<compile_context>
chip_gen: v6e
topology: v6e:2x2x1
jax: 0.10.0
libtpu: 0.0.40
codegen_flags: <defaults>
</compile_context>

<pallas_src>
import functools

import jax
import jax.numpy as jnp
from jax.experimental import pallas as pl
from jax.experimental.pallas import tpu as pltpu


# --------------------------------------------------------------------------
# Kernel
# --------------------------------------------------------------------------
def _residual_kernel(*refs, N, Ho, Wo, Cin, Cout, stride, use_1x1conv, eps,
                     mm_dtype):
    f32 = jnp.float32
    M = N * Ho * Wo
    Hp, Wp = Ho + 2, Wo + 2

    refs = list(refs)
    z_ref = refs.pop()           # scratch: zero-padded conv2 input slab
    out_ref = refs.pop()         # (M, Cout) output
    it = iter(refs)
    if stride == 1:
        xpad_ref = next(it)      # (N, H+2, W+2, Cin) zero-padded input
        p1_ref = xsc_ref = None
    else:
        p1_ref = next(it)        # (M, 9*Cin) im2col patches (strided conv1)
        xsc_ref = next(it)       # (M, Cin) strided shortcut input
        xpad_ref = None
    w1_ref = next(it)            # (9, Cin, Cout) or (9*Cin, Cout)
    w2_ref = next(it)            # (9, Cout, Cout)
    w3_ref = next(it) if use_1x1conv else None
    pp_ref = next(it)            # (8, Cout) packed per-channel params

    def mxu(a, w):
        return jnp.dot(a.astype(mm_dtype), w.astype(mm_dtype),
                       preferred_element_type=f32)

    bc1, g1, be1 = pp_ref[0:1, :], pp_ref[1:2, :], pp_ref[2:3, :]
    bc2, g2, be2 = pp_ref[3:4, :], pp_ref[4:5, :], pp_ref[5:6, :]
    bc3 = pp_ref[6:7, :]

    # ---- conv1 (3x3, pad 1, stride s) ----
    if stride == 1:
        # nine taps are shifted window reads of the zero-padded input slab
        y = jnp.zeros((M, Cout), f32)
        for k in range(9):
            kh, kw = divmod(k, 3)
            tap = xpad_ref[:, kh:kh + Ho, kw:kw + Wo, :].reshape(M, Cin)
            y = y + mxu(tap, w1_ref[k])
        xsc = xpad_ref[:, 1:1 + Ho, 1:1 + Wo, :].reshape(M, Cin)
    else:
        y = mxu(p1_ref[...], w1_ref[...])
        xsc = xsc_ref[...]
    y = y + bc1

    # ---- bn1 (training batch statistics, one pass, folded affine) + relu ----
    mu = jnp.mean(y, axis=0, keepdims=True)
    var = jnp.mean(y * y, axis=0, keepdims=True) - mu * mu
    s1 = g1 * jax.lax.rsqrt(var + eps)
    y = jnp.maximum(y * s1 + (be1 - mu * s1), 0.0)

    # ---- stage into a spatially padded slab (structural zeros for conv2);
    #      only the halo stripes are zeroed, the interior is overwritten.
    z_ref[:, 0:1, :, :] = jnp.zeros((N, 1, Wp, Cout), f32)        # top halo
    z_ref[:, Hp - 1:Hp, :, :] = jnp.zeros((N, 1, Wp, Cout), f32)  # bottom halo
    z_ref[:, :, 0:1, :] = jnp.zeros((N, Hp, 1, Cout), f32)        # left halo
    z_ref[:, :, Wp - 1:Wp, :] = jnp.zeros((N, Hp, 1, Cout), f32)  # right halo
    z_ref[:, 1:1 + Ho, 1:1 + Wo, :] = y.reshape(N, Ho, Wo, Cout)

    # ---- conv2 (3x3, pad 1, stride 1): nine shifted window reads, no masks ---
    y2 = jnp.zeros((M, Cout), f32)
    for k in range(9):
        kh, kw = divmod(k, 3)
        tap = z_ref[:, kh:kh + Ho, kw:kw + Wo, :].reshape(M, Cout)
        y2 = y2 + mxu(tap, w2_ref[k])
    y2 = y2 + bc2

    # ---- bn2 (one pass, folded affine, no relu yet) ----
    mu2 = jnp.mean(y2, axis=0, keepdims=True)
    var2 = jnp.mean(y2 * y2, axis=0, keepdims=True) - mu2 * mu2
    s2 = g2 * jax.lax.rsqrt(var2 + eps)
    y2 = y2 * s2 + (be2 - mu2 * s2)

    # ---- shortcut (1x1 conv or identity) + residual add + final relu ----
    if use_1x1conv:
        sc = mxu(xsc, w3_ref[...]) + bc3
    else:
        sc = xsc
    out_ref[...] = jnp.maximum(y2 + sc, 0.0)


# --------------------------------------------------------------------------
# Wrapper glue (pure JAX: layout, padding; im2col only for the strided conv1)
# --------------------------------------------------------------------------
def _im2col_3x3(x, stride):
    """x: (N,H,W,C) -> patches (N*Ho*Wo, 9*C) for a 3x3 / pad 1 / stride conv."""
    N, H, W, C = x.shape
    Ho = (H - 1) // stride + 1
    Wo = (W - 1) // stride + 1
    xp = jnp.pad(x, ((0, 0), (1, 1), (1, 1), (0, 0)))
    cols = []
    for kh in range(3):
        for kw in range(3):
            win = xp[:, kh:kh + (Ho - 1) * stride + 1:stride,
                     kw:kw + (Wo - 1) * stride + 1:stride, :]
            cols.append(win.reshape(N * Ho * Wo, C))
    return jnp.concatenate(cols, axis=1)


def residual_forward(x_nchw, params, *, use_1x1conv, stride=1, eps=1e-5,
                     matmul_dtype=jnp.float32):
    """Pallas implementation of Residual.forward. (N,Cin,H,W) -> (N,Cout,Ho,Wo)."""
    (w1, bc1, w2, bc2, w3, bc3, g1, be1, g2, be2) = params
    N, Cin, H, W = x_nchw.shape
    Cout = w1.shape[-1]
    Ho = (H - 1) // stride + 1
    Wo = (W - 1) // stride + 1
    M = N * Ho * Wo

    if not use_1x1conv:
        assert Cin == Cout and stride == 1, "identity shortcut needs matching shapes"

    x = jnp.transpose(x_nchw, (0, 2, 3, 1)).astype(jnp.float32)   # NHWC

    # Pack the seven per-channel vectors into one (8, Cout) block: 1 DMA not 7.
    pp = jnp.stack([bc1, g1, be1, bc2, g2, be2, bc3,
                    jnp.zeros_like(bc1)], axis=0)

    full = lambda nd: (lambda i: (0,) * nd)
    args, in_specs = [], []

    def add(a, spec):
        args.append(a)
        in_specs.append(spec)

    if stride == 1:
        # conv1 taps are formed in-kernel from the zero-padded input (no im2col).
        xpad = jnp.pad(x, ((0, 0), (1, 1), (1, 1), (0, 0)))
        add(xpad, pl.BlockSpec((N, H + 2, W + 2, Cin), full(4)))
        add(w1.reshape(9, Cin, Cout), pl.BlockSpec((9, Cin, Cout), full(3)))
    else:
        # Strided conv1 taps are not constant shifts; keep im2col for this case.
        add(_im2col_3x3(x, stride), pl.BlockSpec((M, 9 * Cin), full(2)))
        add(x[:, ::stride, ::stride, :].reshape(M, Cin),
            pl.BlockSpec((M, Cin), full(2)))
        add(w1.reshape(9 * Cin, Cout), pl.BlockSpec((9 * Cin, Cout), full(2)))

    add(w2.reshape(9, Cout, Cout), pl.BlockSpec((9, Cout, Cout), full(3)))
    if use_1x1conv:
        add(w3, pl.BlockSpec((Cin, Cout), full(2)))
    add(pp, pl.BlockSpec((8, Cout), full(2)))

    kernel = functools.partial(
        _residual_kernel, N=N, Ho=Ho, Wo=Wo, Cin=Cin, Cout=Cout, stride=stride,
        use_1x1conv=use_1x1conv, eps=eps, mm_dtype=matmul_dtype)

    out_flat = pl.pallas_call(
        kernel,
        out_shape=jax.ShapeDtypeStruct((M, Cout), jnp.float32),
        grid_spec=pltpu.PrefetchScalarGridSpec(
            num_scalar_prefetch=0,
            grid=(1,),                    # whole block fused (fits VMEM at these shapes)
            in_specs=in_specs,
            out_specs=pl.BlockSpec((M, Cout), full(2)),
            scratch_shapes=[pltpu.VMEM((N, Ho + 2, Wo + 2, Cout), jnp.float32)],
        ),
        compiler_params=pltpu.CompilerParams(
            dimension_semantics=("arbitrary",),
            vmem_limit_bytes=32 * 1024 * 1024),
    )(*args)

    out = out_flat.reshape(N, Ho, Wo, Cout)
    return jnp.transpose(out, (0, 3, 1, 2))                        # back to NCHW


# --------------------------------------------------------------------------
# Parameters + pure-JAX reference
# --------------------------------------------------------------------------
def make_params(key, in_channels, out_channels):
    ks = jax.random.split(key, 10)

    def u(k, shape, fan_in):
        b = 1.0 / jnp.sqrt(float(fan_in))
        return jax.random.uniform(k, shape, jnp.float32, -b, b)

    w1 = u(ks[0], (3, 3, in_channels, out_channels), 9 * in_channels)   # HWIO
    bc1 = u(ks[1], (out_channels,), 9 * in_channels)
    w2 = u(ks[2], (3, 3, out_channels, out_channels), 9 * out_channels)
    bc2 = u(ks[3], (out_channels,), 9 * out_channels)
    w3 = u(ks[4], (in_channels, out_channels), in_channels)             # 1x1 conv
    bc3 = u(ks[5], (out_channels,), in_channels)
    g1 = 1.0 + 0.1 * jax.random.normal(ks[6], (out_channels,), jnp.float32)
    be1 = 0.1 * jax.random.normal(ks[7], (out_channels,), jnp.float32)
    g2 = 1.0 + 0.1 * jax.random.normal(ks[8], (out_channels,), jnp.float32)
    be2 = 0.1 * jax.random.normal(ks[9], (out_channels,), jnp.float32)
    return (w1, bc1, w2, bc2, w3, bc3, g1, be1, g2, be2)


def _bn_train(x, gamma, beta, eps):
    mu = jnp.mean(x, axis=(0, 1, 2), keepdims=True)
    var = jnp.mean(jnp.square(x - mu), axis=(0, 1, 2), keepdims=True)
    return ((x - mu) * jax.lax.rsqrt(var + eps) * gamma.reshape(1, 1, 1, -1)
            + beta.reshape(1, 1, 1, -1))


def reference_forward(x_nchw, params, *, use_1x1conv, stride=1, eps=1e-5):
    """Pure-JAX reference of Residual.forward (training-mode BatchNorm)."""
    (w1, bc1, w2, bc2, w3, bc3, g1, be1, g2, be2) = params
    x = jnp.transpose(x_nchw, (0, 2, 3, 1)).astype(jnp.float32)
    dn = ("NHWC", "HWIO", "NHWC")
    hi = jax.lax.Precision.HIGHEST

    y = jax.lax.conv_general_dilated(x, w1, (stride, stride), ((1, 1), (1, 1)),
                                     dimension_numbers=dn, precision=hi)
    y = y + bc1.reshape(1, 1, 1, -1)
    y = jnp.maximum(_bn_train(y, g1, be1, eps), 0.0)
    y = jax.lax.conv_general_dilated(y, w2, (1, 1), ((1, 1), (1, 1)),
                                     dimension_numbers=dn, precision=hi)
    y = y + bc2.reshape(1, 1, 1, -1)
    y = _bn_train(y, g2, be2, eps)
    if use_1x1conv:
        sc = jax.lax.conv_general_dilated(x, w3.reshape(1, 1, *w3.shape),
                                          (stride, stride), ((0, 0), (0, 0)),
                                          dimension_numbers=dn, precision=hi)
        sc = sc + bc3.reshape(1, 1, 1, -1)
    else:
        sc = x
    out = jnp.maximum(y + sc, 0.0)
    return jnp.transpose(out, (0, 3, 1, 2))


if __name__ == "__main__":
    key = jax.random.PRNGKey(0)
    kx1, kx2, kp1, kp2 = jax.random.split(key, 4)

    configs = [
        # (Cin, Cout, use_1x1conv, stride)
        (4, 8, True, 1),
        (4, 8, True, 2),
        (8, 8, False, 1),
    ]

    N, H, W = 2, 16, 16
    for (cin, cout, use_1x1conv, stride) in configs:
        x = jax.random.normal(kx1 if use_1x1conv else kx2, (N, cin, H, W),
                              jnp.float32)
        params = make_params(kp1 if use_1x1conv else kp2, cin, cout)

        fwd = jax.jit(functools.partial(residual_forward,
                                        use_1x1conv=use_1x1conv, stride=stride))
        out = jax.block_until_ready(fwd(x, params))
        ref = reference_forward(x, params, use_1x1conv=use_1x1conv, stride=stride)

        ho = (H - 1) // stride + 1
        assert out.shape == (N, cout, ho, ho), out.shape
        assert jnp.allclose(out, ref, atol=5e-4, rtol=5e-4), (
            f"mismatch (use_1x1conv={use_1x1conv}, stride={stride}): "
            f"max abs diff {float(jnp.max(jnp.abs(out - ref)))}")

    print("KERNEL_OK")
</pallas_src>

<mosaic_0001>
module attributes {stable_mosaic.version = 11 : i64} {
  func.func @_residual_kernel(%arg0: i32, %arg1: memref<2x18x18x4xf32, #tpu.memory_space<vmem>>, %arg2: memref<9x4x8xf32, #tpu.memory_space<vmem>>, %arg3: memref<9x8x8xf32, #tpu.memory_space<vmem>>, %arg4: memref<4x8xf32, #tpu.memory_space<vmem>>, %arg5: memref<8x8xf32, #tpu.memory_space<vmem>>, %arg6: memref<512x8xf32, #tpu.memory_space<vmem>>, %arg7: memref<2x18x18x8xf32, #tpu.memory_space<vmem>>) attributes {dimension_semantics = [#tpu.dimension_semantics<arbitrary>], iteration_bounds = array<i64: 1>, scalar_prefetch = 0 : i64, scratch_operands = 1 : i64, tpu.core_type = #tpu.core_type<tc>, window_params = [{pipeline_mode = #tpu.pipeline_mode<synchronous>, transform_indices = @transform_0, window_bounds = array<i64: 2, 18, 18, 4>}, {pipeline_mode = #tpu.pipeline_mode<synchronous>, transform_indices = @transform_1, window_bounds = array<i64: 9, 4, 8>}, {pipeline_mode = #tpu.pipeline_mode<synchronous>, transform_indices = @transform_2, window_bounds = array<i64: 9, 8, 8>}, {pipeline_mode = #tpu.pipeline_mode<synchronous>, transform_indices = @transform_3, window_bounds = array<i64: 4, 8>}, {pipeline_mode = #tpu.pipeline_mode<synchronous>, transform_indices = @transform_4, window_bounds = array<i64: 8, 8>}, {pipeline_mode = #tpu.pipeline_mode<synchronous>, transform_indices = @transform_5, window_bounds = array<i64: 512, 8>}]} {
    %c0 = arith.constant 0 : index
    %c0_0 = arith.constant 0 : index
    %0 = vector.load %arg5[%c0, %c0_0] : memref<8x8xf32, #tpu.memory_space<vmem>>, vector<1x8xf32>
    %c1 = arith.constant 1 : index
    %c0_1 = arith.constant 0 : index
    %1 = vector.load %arg5[%c1, %c0_1] : memref<8x8xf32, #tpu.memory_space<vmem>>, vector<1x8xf32>
    %c2 = arith.constant 2 : index
    %c0_2 = arith.constant 0 : index
    %2 = vector.load %arg5[%c2, %c0_2] : memref<8x8xf32, #tpu.memory_space<vmem>>, vector<1x8xf32>
    %c3 = arith.constant 3 : index
    %c0_3 = arith.constant 0 : index
    %3 = vector.load %arg5[%c3, %c0_3] : memref<8x8xf32, #tpu.memory_space<vmem>>, vector<1x8xf32>
    %c4 = arith.constant 4 : index
    %c0_4 = arith.constant 0 : index
    %4 = vector.load %arg5[%c4, %c0_4] : memref<8x8xf32, #tpu.memory_space<vmem>>, vector<1x8xf32>
    %c5 = arith.constant 5 : index
    %c0_5 = arith.constant 0 : index
    %5 = vector.load %arg5[%c5, %c0_5] : memref<8x8xf32, #tpu.memory_space<vmem>>, vector<1x8xf32>
    %c6 = arith.constant 6 : index
    %c0_6 = arith.constant 0 : index
    %6 = vector.load %arg5[%c6, %c0_6] : memref<8x8xf32, #tpu.memory_space<vmem>>, vector<1x8xf32>
    %cst = arith.constant 0.000000e+00 : f32
    %7 = vector.broadcast %cst : f32 to vector<512x8xf32>
    %c0_7 = arith.constant 0 : index
    %c0_8 = arith.constant 0 : index
    %c0_9 = arith.constant 0 : index
    %c0_10 = arith.constant 0 : index
    %8 = vector.load %arg1[%c0_7, %c0_8, %c0_9, %c0_10] : memref<2x18x18x4xf32, #tpu.memory_space<vmem>>, vector<2x16x16x4xf32>
    %9 = vector.shape_cast %8 : vector<2x16x16x4xf32> to vector<512x4xf32>
    %c0_11 = arith.constant 0 : index
    %c0_12 = arith.constant 0 : index
    %c0_13 = arith.constant 0 : index
    %10 = vector.load %arg2[%c0_11, %c0_12, %c0_13] : memref<9x4x8xf32, #tpu.memory_space<vmem>>, vector<1x4x8xf32>
    %11 = vector.shape_cast %10 : vector<1x4x8xf32> to vector<4x8xf32>
    %cst_14 = arith.constant dense<0.000000e+00> : vector<512x8xf32>
    %12 = tpu.matmul %9, %11, %cst_14 {dimension_numbers = #tpu.dot_dimension_numbers<[1], [0], [0], [1], [0, 0, 1, 1], [], []>} : vector<512x4xf32>, vector<4x8xf32>, vector<512x8xf32> -> vector<512x8xf32>
    %13 = arith.addf %7, %12 : vector<512x8xf32>
    %c0_15 = arith.constant 0 : index
    %c0_16 = arith.constant 0 : index
    %c1_17 = arith.constant 1 : index
    %c0_18 = arith.constant 0 : index
    %14 = vector.load %arg1[%c0_15, %c0_16, %c1_17, %c0_18] : memref<2x18x18x4xf32, #tpu.memory_space<vmem>>, vector<2x16x16x4xf32>
    %15 = vector.shape_cast %14 : vector<2x16x16x4xf32> to vector<512x4xf32>
    %c1_19 = arith.constant 1 : index
    %c0_20 = arith.constant 0 : index
    %c0_21 = arith.constant 0 : index
    %16 = vector.load %arg2[%c1_19, %c0_20, %c0_21] : memref<9x4x8xf32, #tpu.memory_space<vmem>>, vector<1x4x8xf32>
    %17 = vector.shape_cast %16 : vector<1x4x8xf32> to vector<4x8xf32>
    %cst_22 = arith.constant dense<0.000000e+00> : vector<512x8xf32>
    %18 = tpu.matmul %15, %17, %cst_22 {dimension_numbers = #tpu.dot_dimension_numbers<[1], [0], [0], [1], [0, 0, 1, 1], [], []>} : vector<512x4xf32>, vector<4x8xf32>, vector<512x8xf32> -> vector<512x8xf32>
    %19 = arith.addf %13, %18 : vector<512x8xf32>
    %c0_23 = arith.constant 0 : index
    %c0_24 = arith.constant 0 : index
    %c2_25 = arith.constant 2 : index
    %c0_26 = arith.constant 0 : index
    %20 = vector.load %arg1[%c0_23, %c0_24, %c2_25, %c0_26] : memref<2x18x18x4xf32, #tpu.memory_space<vmem>>, vector<2x16x16x4xf32>
    %21 = vector.shape_cast %20 : vector<2x16x16x4xf32> to vector<512x4xf32>
    %c2_27 = arith.constant 2 : index
    %c0_28 = arith.constant 0 : index
    %c0_29 = arith.constant 0 : index
    %22 = vector.load %arg2[%c2_27, %c0_28, %c0_29] : memref<9x4x8xf32, #tpu.memory_space<vmem>>, vector<1x4x8xf32>
    %23 = vector.shape_cast %22 : vector<1x4x8xf32> to vector<4x8xf32>
    %cst_30 = arith.constant dense<0.000000e+00> : vector<512x8xf32>
    %24 = tpu.matmul %21, %23, %cst_30 {dimension_numbers = #tpu.dot_dimension_numbers<[1], [0], [0], [1], [0, 0, 1, 1], [], []>} : vector<512x4xf32>, vector<4x8xf32>, vector<512x8xf32> -> vector<512x8xf32>
    %25 = arith.addf %19, %24 : vector<512x8xf32>
    %c0_31 = arith.constant 0 : index
    %c1_32 = arith.constant 1 : index
    %c0_33 = arith.constant 0 : index
    %c0_34 = arith.constant 0 : index
    %26 = vector.load %arg1[%c0_31, %c1_32, %c0_33, %c0_34] : memref<2x18x18x4xf32, #tpu.memory_space<vmem>>, vector<2x16x16x4xf32>
    %27 = vector.shape_cast %26 : vector<2x16x16x4xf32> to vector<512x4xf32>
    %c3_35 = arith.constant 3 : index
    %c0_36 = arith.constant 0 : index
    %c0_37 = arith.constant 0 : index
    %28 = vector.load %arg2[%c3_35, %c0_36, %c0_37] : memref<9x4x8xf32, #tpu.memory_space<vmem>>, vector<1x4x8xf32>
    %29 = vector.shape_cast %28 : vector<1x4x8xf32> to vector<4x8xf32>
    %cst_38 = arith.constant dense<0.000000e+00> : vector<512x8xf32>
    %30 = tpu.matmul %27, %29, %cst_38 {dimension_numbers = #tpu.dot_dimension_numbers<[1], [0], [0], [1], [0, 0, 1, 1], [], []>} : vector<512x4xf32>, vector<4x8xf32>, vector<512x8xf32> -> vector<512x8xf32>
    %31 = arith.addf %25, %30 : vector<512x8xf32>
    %c0_39 = arith.constant 0 : index
    %c1_40 = arith.constant 1 : index
    %c1_41 = arith.constant 1 : index
    %c0_42 = arith.constant 0 : index
    %32 = vector.load %arg1[%c0_39, %c1_40, %c1_41, %c0_42] : memref<2x18x18x4xf32, #tpu.memory_space<vmem>>, vector<2x16x16x4xf32>
    %33 = vector.shape_cast %32 : vector<2x16x16x4xf32> to vector<512x4xf32>
    %c4_43 = arith.constant 4 : index
    %c0_44 = arith.constant 0 : index
    %c0_45 = arith.constant 0 : index
    %34 = vector.load %arg2[%c4_43, %c0_44, %c0_45] : memref<9x4x8xf32, #tpu.memory_space<vmem>>, vector<1x4x8xf32>
    %35 = vector.shape_cast %34 : vector<1x4x8xf32> to vector<4x8xf32>
    %cst_46 = arith.constant dense<0.000000e+00> : vector<512x8xf32>
    %36 = tpu.matmul %33, %35, %cst_46 {dimension_numbers = #tpu.dot_dimension_numbers<[1], [0], [0], [1], [0, 0, 1, 1], [], []>} : vector<512x4xf32>, vector<4x8xf32>, vector<512x8xf32> -> vector<512x8xf32>
    %37 = arith.addf %31, %36 : vector<512x8xf32>
    %c0_47 = arith.constant 0 : index
    %c1_48 = arith.constant 1 : index
    %c2_49 = arith.constant 2 : index
    %c0_50 = arith.constant 0 : index
    %38 = vector.load %arg1[%c0_47, %c1_48, %c2_49, %c0_50] : memref<2x18x18x4xf32, #tpu.memory_space<vmem>>, vector<2x16x16x4xf32>
    %39 = vector.shape_cast %38 : vector<2x16x16x4xf32> to vector<512x4xf32>
    %c5_51 = arith.constant 5 : index
    %c0_52 = arith.constant 0 : index
    %c0_53 = arith.constant 0 : index
    %40 = vector.load %arg2[%c5_51, %c0_52, %c0_53] : memref<9x4x8xf32, #tpu.memory_space<vmem>>, vector<1x4x8xf32>
    %41 = vector.shape_cast %40 : vector<1x4x8xf32> to vector<4x8xf32>
    %cst_54 = arith.constant dense<0.000000e+00> : vector<512x8xf32>
    %42 = tpu.matmul %39, %41, %cst_54 {dimension_numbers = #tpu.dot_dimension_numbers<[1], [0], [0], [1], [0, 0, 1, 1], [], []>} : vector<512x4xf32>, vector<4x8xf32>, vector<512x8xf32> -> vector<512x8xf32>
    %43 = arith.addf %37, %42 : vector<512x8xf32>
    %c0_55 = arith.constant 0 : index
    %c2_56 = arith.constant 2 : index
    %c0_57 = arith.constant 0 : index
    %c0_58 = arith.constant 0 : index
    %44 = vector.load %arg1[%c0_55, %c2_56, %c0_57, %c0_58] : memref<2x18x18x4xf32, #tpu.memory_space<vmem>>, vector<2x16x16x4xf32>
    %45 = vector.shape_cast %44 : vector<2x16x16x4xf32> to vector<512x4xf32>
    %c6_59 = arith.constant 6 : index
    %c0_60 = arith.constant 0 : index
    %c0_61 = arith.constant 0 : index
    %46 = vector.load %arg2[%c6_59, %c0_60, %c0_61] : memref<9x4x8xf32, #tpu.memory_space<vmem>>, vector<1x4x8xf32>
    %47 = vector.shape_cast %46 : vector<1x4x8xf32> to vector<4x8xf32>
    %cst_62 = arith.constant dense<0.000000e+00> : vector<512x8xf32>
    %48 = tpu.matmul %45, %47, %cst_62 {dimension_numbers = #tpu.dot_dimension_numbers<[1], [0], [0], [1], [0, 0, 1, 1], [], []>} : vector<512x4xf32>, vector<4x8xf32>, vector<512x8xf32> -> vector<512x8xf32>
    %49 = arith.addf %43, %48 : vector<512x8xf32>
    %c0_63 = arith.constant 0 : index
    %c2_64 = arith.constant 2 : index
    %c1_65 = arith.constant 1 : index
    %c0_66 = arith.constant 0 : index
    %50 = vector.load %arg1[%c0_63, %c2_64, %c1_65, %c0_66] : memref<2x18x18x4xf32, #tpu.memory_space<vmem>>, vector<2x16x16x4xf32>
    %51 = vector.shape_cast %50 : vector<2x16x16x4xf32> to vector<512x4xf32>
    %c7 = arith.constant 7 : index
    %c0_67 = arith.constant 0 : index
    %c0_68 = arith.constant 0 : index
    %52 = vector.load %arg2[%c7, %c0_67, %c0_68] : memref<9x4x8xf32, #tpu.memory_space<vmem>>, vector<1x4x8xf32>
    %53 = vector.shape_cast %52 : vector<1x4x8xf32> to vector<4x8xf32>
    %cst_69 = arith.constant dense<0.000000e+00> : vector<512x8xf32>
    %54 = tpu.matmul %51, %53, %cst_69 {dimension_numbers = #tpu.dot_dimension_numbers<[1], [0], [0], [1], [0, 0, 1, 1], [], []>} : vector<512x4xf32>, vector<4x8xf32>, vector<512x8xf32> -> vector<512x8xf32>
    %55 = arith.addf %49, %54 : vector<512x8xf32>
    %c0_70 = arith.constant 0 : index
    %c2_71 = arith.constant 2 : index
    %c2_72 = arith.constant 2 : index
    %c0_73 = arith.constant 0 : index
    %56 = vector.load %arg1[%c0_70, %c2_71, %c2_72, %c0_73] : memref<2x18x18x4xf32, #tpu.memory_space<vmem>>, vector<2x16x16x4xf32>
    %57 = vector.shape_cast %56 : vector<2x16x16x4xf32> to vector<512x4xf32>
    %c8 = arith.constant 8 : index
    %c0_74 = arith.constant 0 : index
    %c0_75 = arith.constant 0 : index
    %58 = vector.load %arg2[%c8, %c0_74, %c0_75] : memref<9x4x8xf32, #tpu.memory_space<vmem>>, vector<1x4x8xf32>
    %59 = vector.shape_cast %58 : vector<1x4x8xf32> to vector<4x8xf32>
    %cst_76 = arith.constant dense<0.000000e+00> : vector<512x8xf32>
    %60 = tpu.matmul %57, %59, %cst_76 {dimension_numbers = #tpu.dot_dimension_numbers<[1], [0], [0], [1], [0, 0, 1, 1], [], []>} : vector<512x4xf32>, vector<4x8xf32>, vector<512x8xf32> -> vector<512x8xf32>
    %61 = arith.addf %55, %60 : vector<512x8xf32>
    %c0_77 = arith.constant 0 : index
    %c1_78 = arith.constant 1 : index
    %c1_79 = arith.constant 1 : index
    %c0_80 = arith.constant 0 : index
    %62 = vector.load %arg1[%c0_77, %c1_78, %c1_79, %c0_80] : memref<2x18x18x4xf32, #tpu.memory_space<vmem>>, vector<2x16x16x4xf32>
    %63 = vector.shape_cast %62 : vector<2x16x16x4xf32> to vector<512x4xf32>
    %64 = vector.broadcast %0 : vector<1x8xf32> to vector<512x8xf32>
    %65 = arith.addf %61, %64 : vector<512x8xf32>
    %cst_81 = arith.constant dense<0.000000e+00> : vector<8xf32>
    %66 = vector.multi_reduction <add>, %65, %cst_81 [0] : vector<512x8xf32> to vector<8xf32>
    %67 = vector.shape_cast %66 : vector<8xf32> to vector<1x8xf32>
    %cst_82 = arith.constant 5.120000e+02 : f32
    %68 = vector.broadcast %cst_82 : f32 to vector<1x8xf32>
    %69 = arith.divf %67, %68 : vector<1x8xf32>
    %70 = arith.mulf %65, %65 : vector<512x8xf32>
    %cst_83 = arith.constant dense<0.000000e+00> : vector<8xf32>
    %71 = vector.multi_reduction <add>, %70, %cst_83 [0] : vector<512x8xf32> to vector<8xf32>
    %72 = vector.shape_cast %71 : vector<8xf32> to vector<1x8xf32>
    %cst_84 = arith.constant 5.120000e+02 : f32
    %73 = vector.broadcast %cst_84 : f32 to vector<1x8xf32>
    %74 = arith.divf %72, %73 : vector<1x8xf32>
    %75 = arith.mulf %69, %69 : vector<1x8xf32>
    %76 = arith.subf %74, %75 : vector<1x8xf32>
    %cst_85 = arith.constant 9.99999974E-6 : f32
    %77 = vector.broadcast %cst_85 : f32 to vector<1x8xf32>
    %78 = arith.addf %76, %77 : vector<1x8xf32>
    %79 = math.rsqrt %78 : vector<1x8xf32>
    %80 = arith.mulf %1, %79 : vector<1x8xf32>
    %81 = vector.broadcast %80 : vector<1x8xf32> to vector<512x8xf32>
    %82 = arith.mulf %65, %81 : vector<512x8xf32>
    %83 = arith.mulf %69, %80 : vector<1x8xf32>
    %84 = arith.subf %2, %83 : vector<1x8xf32>
    %85 = vector.broadcast %84 : vector<1x8xf32> to vector<512x8xf32>
    %86 = arith.addf %82, %85 : vector<512x8xf32>
    %cst_86 = arith.constant 0.000000e+00 : f32
    %87 = vector.broadcast %cst_86 : f32 to vector<512x8xf32>
    %88 = arith.maximumf %86, %87 : vector<512x8xf32>
    %cst_87 = arith.constant 0.000000e+00 : f32
    %89 = vector.broadcast %cst_87 : f32 to vector<2x1x18x8xf32>
    %c0_88 = arith.constant 0 : index
    %c0_89 = arith.constant 0 : index
    %c0_90 = arith.constant 0 : index
    %c0_91 = arith.constant 0 : index
    %90 = vector.load %arg7[%c0_88, %c0_89, %c0_90, %c0_91] : memref<2x18x18x8xf32, #tpu.memory_space<vmem>>, vector<2x1x18x8xf32>
    tpu.vector_store %arg7[%c0_88, %c0_89, %c0_90, %c0_91], %89 {strides = array<i32>} : memref<2x18x18x8xf32, #tpu.memory_space<vmem>>, vector<2x1x18x8xf32>,
    %cst_92 = arith.constant 0.000000e+00 : f32
    %91 = vector.broadcast %cst_92 : f32 to vector<2x1x18x8xf32>
    %c0_93 = arith.constant 0 : index
    %c17 = arith.constant 17 : index
    %c0_94 = arith.constant 0 : index
    %c0_95 = arith.constant 0 : index
    %92 = vector.load %arg7[%c0_93, %c17, %c0_94, %c0_95] : memref<2x18x18x8xf32, #tpu.memory_space<vmem>>, vector<2x1x18x8xf32>
    tpu.vector_store %arg7[%c0_93, %c17, %c0_94, %c0_95], %91 {strides = array<i32>} : memref<2x18x18x8xf32, #tpu.memory_space<vmem>>, vector<2x1x18x8xf32>,
    %cst_96 = arith.constant 0.000000e+00 : f32
    %93 = vector.broadcast %cst_96 : f32 to vector<2x18x1x8xf32>
    %c0_97 = arith.constant 0 : index
    %c0_98 = arith.constant 0 : index
    %c0_99 = arith.constant 0 : index
    %c0_100 = arith.constant 0 : index
    %94 = vector.load %arg7[%c0_97, %c0_98, %c0_99, %c0_100] : memref<2x18x18x8xf32, #tpu.memory_space<vmem>>, vector<2x18x1x8xf32>
    tpu.vector_store %arg7[%c0_97, %c0_98, %c0_99, %c0_100], %93 {strides = array<i32>} : memref<2x18x18x8xf32, #tpu.memory_space<vmem>>, vector<2x18x1x8xf32>,
    %cst_101 = arith.constant 0.000000e+00 : f32
    %95 = vector.broadcast %cst_101 : f32 to vector<2x18x1x8xf32>
    %c0_102 = arith.constant 0 : index
    %c0_103 = arith.constant 0 : index
    %c17_104 = arith.constant 17 : index
    %c0_105 = arith.constant 0 : index
    %96 = vector.load %arg7[%c0_102, %c0_103, %c17_104, %c0_105] : memref<2x18x18x8xf32, #tpu.memory_space<vmem>>, vector<2x18x1x8xf32>
    tpu.vector_store %arg7[%c0_102, %c0_103, %c17_104, %c0_105], %95 {strides = array<i32>} : memref<2x18x18x8xf32, #tpu.memory_space<vmem>>, vector<2x18x1x8xf32>,
    %97 = vector.shape_cast %88 : vector<512x8xf32> to vector<2x16x16x8xf32>
    %c0_106 = arith.constant 0 : index
    %c1_107 = arith.constant 1 : index
    %c1_108 = arith.constant 1 : index
    %c0_109 = arith.constant 0 : index
    %98 = vector.load %arg7[%c0_106, %c1_107, %c1_108, %c0_109] : memref<2x18x18x8xf32, #tpu.memory_space<vmem>>, vector<2x16x16x8xf32>
    tpu.vector_store %arg7[%c0_106, %c1_107, %c1_108, %c0_109], %97 {strides = array<i32>} : memref<2x18x18x8xf32, #tpu.memory_space<vmem>>, vector<2x16x16x8xf32>,
    %cst_110 = arith.constant 0.000000e+00 : f32
    %99 = vector.broadcast %cst_110 : f32 to vector<512x8xf32>
    %c0_111 = arith.constant 0 : index
    %c0_112 = arith.constant 0 : index
    %c0_113 = arith.constant 0 : index
    %c0_114 = arith.constant 0 : index
    %100 = vector.load %arg7[%c0_111, %c0_112, %c0_113, %c0_114] : memref<2x18x18x8xf32, #tpu.memory_space<vmem>>, vector<2x16x16x8xf32>
    %101 = vector.shape_cast %100 : vector<2x16x16x8xf32> to vector<512x8xf32>
    %c0_115 = arith.constant 0 : index
    %c0_116 = arith.constant 0 : index
    %c0_117 = arith.constant 0 : index
    %102 = vector.load %arg3[%c0_115, %c0_116, %c0_117] : memref<9x8x8xf32, #tpu.memory_space<vmem>>, vector<1x8x8xf32>
    %103 = vector.shape_cast %102 : vector<1x8x8xf32> to vector<8x8xf32>
    %cst_118 = arith.constant dense<0.000000e+00> : vector<512x8xf32>
    %104 = tpu.matmul %101, %103, %cst_118 {dimension_numbers = #tpu.dot_dimension_numbers<[1], [0], [0], [1], [0, 0, 1, 1], [], []>} : vector<512x8xf32>, vector<8x8xf32>, vector<512x8xf32> -> vector<512x8xf32>
    %105 = arith.addf %99, %104 : vector<512x8xf32>
    %c0_119 = arith.constant 0 : index
    %c0_120 = arith.constant 0 : index
    %c1_121 = arith.constant 1 : index
    %c0_122 = arith.constant 0 : index
    %106 = vector.load %arg7[%c0_119, %c0_120, %c1_121, %c0_122] : memref<2x18x18x8xf32, #tpu.memory_space<vmem>>, vector<2x16x16x8xf32>
    %107 = vector.shape_cast %106 : vector<2x16x16x8xf32> to vector<512x8xf32>
    %c1_123 = arith.constant 1 : index
    %c0_124 = arith.constant 0 : index
    %c0_125 = arith.constant 0 : index
    %108 = vector.load %arg3[%c1_123, %c0_124, %c0_125] : memref<9x8x8xf32, #tpu.memory_space<vmem>>, vector<1x8x8xf32>
    %109 = vector.shape_cast %108 : vector<1x8x8xf32> to vector<8x8xf32>
    %cst_126 = arith.constant dense<0.000000e+00> : vector<512x8xf32>
    %110 = tpu.matmul %107, %109, %cst_126 {dimension_numbers = #tpu.dot_dimension_numbers<[1], [0], [0], [1], [0, 0, 1, 1], [], []>} : vector<512x8xf32>, vector<8x8xf32>, vector<512x8xf32> -> vector<512x8xf32>
    %111 = arith.addf %105, %110 : vector<512x8xf32>
    %c0_127 = arith.constant 0 : index
    %c0_128 = arith.constant 0 : index
    %c2_129 = arith.constant 2 : index
    %c0_130 = arith.constant 0 : index
    %112 = vector.load %arg7[%c0_127, %c0_128, %c2_129, %c0_130] : memref<2x18x18x8xf32, #tpu.memory_space<vmem>>, vector<2x16x16x8xf32>
    %113 = vector.shape_cast %112 : vector<2x16x16x8xf32> to vector<512x8xf32>
    %c2_131 = arith.constant 2 : index
    %c0_132 = arith.constant 0 : index
    %c0_133 = arith.constant 0 : index
    %114 = vector.load %arg3[%c2_131, %c0_132, %c0_133] : memref<9x8x8xf32, #tpu.memory_space<vmem>>, vector<1x8x8xf32>
    %115 = vector.shape_cast %114 : vector<1x8x8xf32> to vector<8x8xf32>
    %cst_134 = arith.constant dense<0.000000e+00> : vector<512x8xf32>
    %116 = tpu.matmul %113, %115, %cst_134 {dimension_numbers = #tpu.dot_dimension_numbers<[1], [0], [0], [1], [0, 0, 1, 1], [], []>} : vector<512x8xf32>, vector<8x8xf32>, vector<512x8xf32> -> vector<512x8xf32>
    %117 = arith.addf %111, %116 : vector<512x8xf32>
    %c0_135 = arith.constant 0 : index
    %c1_136 = arith.constant 1 : index
    %c0_137 = arith.constant 0 : index
    %c0_138 = arith.constant 0 : index
    %118 = vector.load %arg7[%c0_135, %c1_136, %c0_137, %c0_138] : memref<2x18x18x8xf32, #tpu.memory_space<vmem>>, vector<2x16x16x8xf32>
    %119 = vector.shape_cast %118 : vector<2x16x16x8xf32> to vector<512x8xf32>
    %c3_139 = arith.constant 3 : index
    %c0_140 = arith.constant 0 : index
    %c0_141 = arith.constant 0 : index
    %120 = vector.load %arg3[%c3_139, %c0_140, %c0_141] : memref<9x8x8xf32, #tpu.memory_space<vmem>>, vector<1x8x8xf32>
    %121 = vector.shape_cast %120 : vector<1x8x8xf32> to vector<8x8xf32>
    %cst_142 = arith.constant dense<0.000000e+00> : vector<512x8xf32>
    %122 = tpu.matmul %119, %121, %cst_142 {dimension_numbers = #tpu.dot_dimension_numbers<[1], [0], [0], [1], [0, 0, 1, 1], [], []>} : vector<512x8xf32>, vector<8x8xf32>, vector<512x8xf32> -> vector<512x8xf32>
    %123 = arith.addf %117, %122 : vector<512x8xf32>
    %c0_143 = arith.constant 0 : index
    %c1_144 = arith.constant 1 : index
    %c1_145 = arith.constant 1 : index
    %c0_146 = arith.constant 0 : index
    %124 = vector.load %arg7[%c0_143, %c1_144, %c1_145, %c0_146] : memref<2x18x18x8xf32, #tpu.memory_space<vmem>>, vector<2x16x16x8xf32>
    %125 = vector.shape_cast %124 : vector<2x16x16x8xf32> to vector<512x8xf32>
    %c4_147 = arith.constant 4 : index
    %c0_148 = arith.constant 0 : index
    %c0_149 = arith.constant 0 : index
    %126 = vector.load %arg3[%c4_147, %c0_148, %c0_149] : memref<9x8x8xf32, #tpu.memory_space<vmem>>, vector<1x8x8xf32>
    %127 = vector.shape_cast %126 : vector<1x8x8xf32> to vector<8x8xf32>
    %cst_150 = arith.constant dense<0.000000e+00> : vector<512x8xf32>
    %128 = tpu.matmul %125, %127, %cst_150 {dimension_numbers = #tpu.dot_dimension_numbers<[1], [0], [0], [1], [0, 0, 1, 1], [], []>} : vector<512x8xf32>, vector<8x8xf32>, vector<512x8xf32> -> vector<512x8xf32>
    %129 = arith.addf %123, %128 : vector<512x8xf32>
    %c0_151 = arith.constant 0 : index
    %c1_152 = arith.constant 1 : index
    %c2_153 = arith.constant 2 : index
    %c0_154 = arith.constant 0 : index
    %130 = vector.load %arg7[%c0_151, %c1_152, %c2_153, %c0_154] : memref<2x18x18x8xf32, #tpu.memory_space<vmem>>, vector<2x16x16x8xf32>
    %131 = vector.shape_cast %130 : vector<2x16x16x8xf32> to vector<512x8xf32>
    %c5_155 = arith.constant 5 : index
    %c0_156 = arith.constant 0 : index
    %c0_157 = arith.constant 0 : index
    %132 = vector.load %arg3[%c5_155, %c0_156, %c0_157] : memref<9x8x8xf32, #tpu.memory_space<vmem>>, vector<1x8x8xf32>
    %133 = vector.shape_cast %132 : vector<1x8x8xf32> to vector<8x8xf32>
    %cst_158 = arith.constant dense<0.000000e+00> : vector<512x8xf32>
    %134 = tpu.matmul %131, %133, %cst_158 {dimension_numbers = #tpu.dot_dimension_numbers<[1], [0], [0], [1], [0, 0, 1, 1], [], []>} : vector<512x8xf32>, vector<8x8xf32>, vector<512x8xf32> -> vector<512x8xf32>
    %135 = arith.addf %129, %134 : vector<512x8xf32>
    %c0_159 = arith.constant 0 : index
    %c2_160 = arith.constant 2 : index
    %c0_161 = arith.constant 0 : index
    %c0_162 = arith.constant 0 : index
    %136 = vector.load %arg7[%c0_159, %c2_160, %c0_161, %c0_162] : memref<2x18x18x8xf32, #tpu.memory_space<vmem>>, vector<2x16x16x8xf32>
    %137 = vector.shape_cast %136 : vector<2x16x16x8xf32> to vector<512x8xf32>
    %c6_163 = arith.constant 6 : index
    %c0_164 = arith.constant 0 : index
    %c0_165 = arith.constant 0 : index
    %138 = vector.load %arg3[%c6_163, %c0_164, %c0_165] : memref<9x8x8xf32, #tpu.memory_space<vmem>>, vector<1x8x8xf32>
    %139 = vector.shape_cast %138 : vector<1x8x8xf32> to vector<8x8xf32>
    %cst_166 = arith.constant dense<0.000000e+00> : vector<512x8xf32>
    %140 = tpu.matmul %137, %139, %cst_166 {dimension_numbers = #tpu.dot_dimension_numbers<[1], [0], [0], [1], [0, 0, 1, 1], [], []>} : vector<512x8xf32>, vector<8x8xf32>, vector<512x8xf32> -> vector<512x8xf32>
    %141 = arith.addf %135, %140 : vector<512x8xf32>
    %c0_167 = arith.constant 0 : index
    %c2_168 = arith.constant 2 : index
    %c1_169 = arith.constant 1 : index
    %c0_170 = arith.constant 0 : index
    %142 = vector.load %arg7[%c0_167, %c2_168, %c1_169, %c0_170] : memref<2x18x18x8xf32, #tpu.memory_space<vmem>>, vector<2x16x16x8xf32>
    %143 = vector.shape_cast %142 : vector<2x16x16x8xf32> to vector<512x8xf32>
    %c7_171 = arith.constant 7 : index
    %c0_172 = arith.constant 0 : index
    %c0_173 = arith.constant 0 : index
    %144 = vector.load %arg3[%c7_171, %c0_172, %c0_173] : memref<9x8x8xf32, #tpu.memory_space<vmem>>, vector<1x8x8xf32>
    %145 = vector.shape_cast %144 : vector<1x8x8xf32> to vector<8x8xf32>
    %cst_174 = arith.constant dense<0.000000e+00> : vector<512x8xf32>
    %146 = tpu.matmul %143, %145, %cst_174 {dimension_numbers = #tpu.dot_dimension_numbers<[1], [0], [0], [1], [0, 0, 1, 1], [], []>} : vector<512x8xf32>, vector<8x8xf32>, vector<512x8xf32> -> vector<512x8xf32>
    %147 = arith.addf %141, %146 : vector<512x8xf32>
    %c0_175 = arith.constant 0 : index
    %c2_176 = arith.constant 2 : index
    %c2_177 = arith.constant 2 : index
    %c0_178 = arith.constant 0 : index
    %148 = vector.load %arg7[%c0_175, %c2_176, %c2_177, %c0_178] : memref<2x18x18x8xf32, #tpu.memory_space<vmem>>, vector<2x16x16x8xf32>
    %149 = vector.shape_cast %148 : vector<2x16x16x8xf32> to vector<512x8xf32>
    %c8_179 = arith.constant 8 : index
    %c0_180 = arith.constant 0 : index
    %c0_181 = arith.constant 0 : index
    %150 = vector.load %arg3[%c8_179, %c0_180, %c0_181] : memref<9x8x8xf32, #tpu.memory_space<vmem>>, vector<1x8x8xf32>
    %151 = vector.shape_cast %150 : vector<1x8x8xf32> to vector<8x8xf32>
    %cst_182 = arith.constant dense<0.000000e+00> : vector<512x8xf32>
    %152 = tpu.matmul %149, %151, %cst_182 {dimension_numbers = #tpu.dot_dimension_numbers<[1], [0], [0], [1], [0, 0, 1, 1], [], []>} : vector<512x8xf32>, vector<8x8xf32>, vector<512x8xf32> -> vector<512x8xf32>
    %153 = arith.addf %147, %152 : vector<512x8xf32>
    %154 = vector.broadcast %3 : vector<1x8xf32> to vector<512x8xf32>
    %155 = arith.addf %153, %154 : vector<512x8xf32>
    %cst_183 = arith.constant dense<0.000000e+00> : vector<8xf32>
    %156 = vector.multi_reduction <add>, %155, %cst_183 [0] : vector<512x8xf32> to vector<8xf32>
    %157 = vector.shape_cast %156 : vector<8xf32> to vector<1x8xf32>
    %cst_184 = arith.constant 5.120000e+02 : f32
    %158 = vector.broadcast %cst_184 : f32 to vector<1x8xf32>
    %159 = arith.divf %157, %158 : vector<1x8xf32>
    %160 = arith.mulf %155, %155 : vector<512x8xf32>
    %cst_185 = arith.constant dense<0.000000e+00> : vector<8xf32>
    %161 = vector.multi_reduction <add>, %160, %cst_185 [0] : vector<512x8xf32> to vector<8xf32>
    %162 = vector.shape_cast %161 : vector<8xf32> to vector<1x8xf32>
    %cst_186 = arith.constant 5.120000e+02 : f32
    %163 = vector.broadcast %cst_186 : f32 to vector<1x8xf32>
    %164 = arith.divf %162, %163 : vector<1x8xf32>
    %165 = arith.mulf %159, %159 : vector<1x8xf32>
    %166 = arith.subf %164, %165 : vector<1x8xf32>
    %cst_187 = arith.constant 9.99999974E-6 : f32
    %167 = vector.broadcast %cst_187 : f32 to vector<1x8xf32>
    %168 = arith.addf %166, %167 : vector<1x8xf32>
    %169 = math.rsqrt %168 : vector<1x8xf32>
    %170 = arith.mulf %4, %169 : vector<1x8xf32>
    %171 = vector.broadcast %170 : vector<1x8xf32> to vector<512x8xf32>
    %172 = arith.mulf %155, %171 : vector<512x8xf32>
    %173 = arith.mulf %159, %170 : vector<1x8xf32>
    %174 = arith.subf %5, %173 : vector<1x8xf32>
    %175 = vector.broadcast %174 : vector<1x8xf32> to vector<512x8xf32>
    %176 = arith.addf %172, %175 : vector<512x8xf32>
    %c0_188 = arith.constant 0 : index
    %c0_189 = arith.constant 0 : index
    %177 = vector.load %arg4[%c0_188, %c0_189] : memref<4x8xf32, #tpu.memory_space<vmem>>, vector<4x8xf32>
    %cst_190 = arith.constant dense<0.000000e+00> : vector<512x8xf32>
    %178 = tpu.matmul %63, %177, %cst_190 {dimension_numbers = #tpu.dot_dimension_numbers<[1], [0], [0], [1], [0, 0, 1, 1], [], []>} : vector<512x4xf32>, vector<4x8xf32>, vector<512x8xf32> -> vector<512x8xf32>
    %179 = vector.broadcast %6 : vector<1x8xf32> to vector<512x8xf32>
    %180 = arith.addf %178, %179 : vector<512x8xf32>
    %181 = arith.addf %176, %180 : vector<512x8xf32>
    %cst_191 = arith.constant 0.000000e+00 : f32
    %182 = vector.broadcast %cst_191 : f32 to vector<512x8xf32>
    %183 = arith.maximumf %181, %182 : vector<512x8xf32>
    %c0_192 = arith.constant 0 : index
    %c0_193 = arith.constant 0 : index
    %184 = vector.load %arg6[%c0_192, %c0_193] : memref<512x8xf32, #tpu.memory_space<vmem>>, vector<512x8xf32>
    tpu.vector_store %arg6[%c0_192, %c0_193], %183 {strides = array<i32>} : memref<512x8xf32, #tpu.memory_space<vmem>>, vector<512x8xf32>,
    return
  }
  func.func @transform_0(%arg0: i32) -> (i32, i32, i32, i32) {
    %c0_i32 = arith.constant 0 : i32
    %c0_i32_0 = arith.constant 0 : i32
    %c0_i32_1 = arith.constant 0 : i32
    %c0_i32_2 = arith.constant 0 : i32
    %c0_i32_3 = arith.constant 0 : i32
    return %c0_i32, %c0_i32_0, %c0_i32_1, %c0_i32_2 : i32, i32, i32, i32
  }
  func.func @transform_1(%arg0: i32) -> (i32, i32, i32) {
    %c0_i32 = arith.constant 0 : i32
    %c0_i32_0 = arith.constant 0 : i32
    %c0_i32_1 = arith.constant 0 : i32
    %c0_i32_2 = arith.constant 0 : i32
    return %c0_i32, %c0_i32_0, %c0_i32_1 : i32, i32, i32
  }
  func.func @transform_2(%arg0: i32) -> (i32, i32, i32) {
    %c0_i32 = arith.constant 0 : i32
    %c0_i32_0 = arith.constant 0 : i32
    %c0_i32_1 = arith.constant 0 : i32
    %c0_i32_2 = arith.constant 0 : i32
    return %c0_i32, %c0_i32_0, %c0_i32_1 : i32, i32, i32
  }
  func.func @transform_3(%arg0: i32) -> (i32, i32) {
    %c0_i32 = arith.constant 0 : i32
    %c0_i32_0 = arith.constant 0 : i32
    %c0_i32_1 = arith.constant 0 : i32
    return %c0_i32, %c0_i32_0 : i32, i32
  }
  func.func @transform_4(%arg0: i32) -> (i32, i32) {
    %c0_i32 = arith.constant 0 : i32
    %c0_i32_0 = arith.constant 0 : i32
    %c0_i32_1 = arith.constant 0 : i32
    return %c0_i32, %c0_i32_0 : i32, i32
  }
  func.func @transform_5(%arg0: i32) -> (i32, i32) {
    %c0_i32 = arith.constant 0 : i32
    %c0_i32_0 = arith.constant 0 : i32
    %c0_i32_1 = arith.constant 0 : i32
    return %c0_i32, %c0_i32_0 : i32, i32
  }
}

</mosaic_0001>

<llo_original>
// kernel: residual_forward.1
$region0: #{residual_forward.1}
  #allocation0 [shape = 'u32[]', space=smem, size = 0x4, offset = 0x4, fixed_abs, tag = 'smem constant byte address 0x4 - core index']
  #allocation1 [shape = 'u32[144,128]{1,0:T(1,128)}', space=vmem, size = 0x12000, scoped, tag = 'internal scratch']
  #allocation2 [shape = 'f32[2,18,18,8]{3,2,1,0:T(8,128)}', space=vmem, size = 0x6c000, scoped, tag = 'scratch operand']
  %s0 = inlined_call_operand.vmem [shape: f32[2,18,18,4], index: 0, kind: input, shape index: {}]
  %s1 = inlined_call_operand.vmem [shape: f32[9,4,8], index: 1, kind: input, shape index: {}]
  %s2 = inlined_call_operand.vmem [shape: f32[9,8,8], index: 2, kind: input, shape index: {}]
  %s3 = inlined_call_operand.vmem [shape: f32[4,8], index: 3, kind: input, shape index: {}]
  %s4 = inlined_call_operand.vmem [shape: f32[8,8], index: 4, kind: input, shape index: {}]
  %s5 = inlined_call_operand.vmem [shape: f32[512,8], index: 5, kind: output, shape index: {}]
  %s6 = sld [smem:[#allocation0]]
  $region30: #{residual_forward.1} parent=0
    _
  %s8 = ssub.s32 1, %s6
  %s9 = scalar_select 0, %s8, %s6
  // Predicated region
  $region2: #{residual_forward.1} parent=0 // pred_check
    _
  $region3: #{residual_forward.1} parent=0 // pred_check_branch
    %11 = sbr.rel (0) target = $region5
  $region4: #{residual_forward.1} parent=0 // pred_region
    _
  $region5: #{residual_forward.1} parent=0 // pred_fallthru
    _
  // Predicated region
  $region6: #{residual_forward.1} parent=0 // pred_check
    _
  $region7: #{residual_forward.1} parent=0 // pred_check_branch
    %13 = sbr.rel (0) target = $region9
  $region8: #{residual_forward.1} parent=0 // pred_region
    _
  $region9: #{residual_forward.1} parent=0 // pred_fallthru
    _
  // Predicated region
  $region10: #{residual_forward.1} parent=0 // pred_check
    _
  $region11: #{residual_forward.1} parent=0 // pred_check_branch
    %15 = sbr.rel (0) target = $region13
  $region12: #{residual_forward.1} parent=0 // pred_region
    _
  $region13: #{residual_forward.1} parent=0 // pred_fallthru
    _
  // Predicated region
  $region14: #{residual_forward.1} parent=0 // pred_check
    _
  $region15: #{residual_forward.1} parent=0 // pred_check_branch
    %17 = sbr.rel (0) target = $region17
  $region16: #{residual_forward.1} parent=0 // pred_region
    _
  $region17: #{residual_forward.1} parent=0 // pred_fallthru
    _
  // Predicated region
  $region18: #{residual_forward.1} parent=0 // pred_check
    _
  $region19: #{residual_forward.1} parent=0 // pred_check_branch
    %19 = sbr.rel (0) target = $region21
  $region20: #{residual_forward.1} parent=0 // pred_region
    _
  $region21: #{residual_forward.1} parent=0 // pred_fallthru
    _
  %v20 = vld [vmem:[%s4] sm:$0x1]
  %v21 = vld [vmem:[%s4 + $0x1] sm:$0x1]
  %v22 = vld [vmem:[%s4 + $0x2] sm:$0x1]
  %v23 = vld [vmem:[%s4 + $0x3] sm:$0x1]
  %v24 = vld [vmem:[%s4 + $0x4] sm:$0x1]
  %v25 = vld [vmem:[%s4 + $0x5] sm:$0x1]
  %v26 = vld [vmem:[%s4 + $0x6] sm:$0x1]
  %v27 = vld [vmem:[%s0] sm:$0xff]
  %v28 = vld [vmem:[%s0 + $0x8] sm:$0xff]
  %v29 = vld [vmem:[%s0 + $0x18] sm:$0xff]
  %v30 = vld [vmem:[%s0 + $0x20] sm:$0xff]
  %v31 = vld [vmem:[%s0 + $0x30] sm:$0xff]
  %v32 = vld [vmem:[%s0 + $0x38] sm:$0xff]
  %v33 = vld [vmem:[%s0 + $0x48] sm:$0xff]
  %v34 = vld [vmem:[%s0 + $0x50] sm:$0xff]
  %v35 = vld [vmem:[%s0 + $0x60] sm:$0xff]
  %v36 = vld [vmem:[%s0 + $0x68] sm:$0xff]
  %v37 = vld [vmem:[%s0 + $0x78] sm:$0xff]
  %v38 = vld [vmem:[%s0 + $0x80] sm:$0xff]
  %v39 = vld [vmem:[%s0 + $0x90] sm:$0xff]
  %v40 = vld [vmem:[%s0 + $0x98] sm:$0xff]
  %v41 = vld [vmem:[%s0 + $0xa8] sm:$0xff]
  %v42 = vld [vmem:[%s0 + $0xb0] sm:$0xff]
  %v43 = vld [vmem:[%s0 + $0xc0] sm:$0xff]
  %v44 = vld [vmem:[%s0 + $0xc8] sm:$0xff]
  %v45 = vld [vmem:[%s0 + $0xd8] sm:$0xff]
  %v46 = vld [vmem:[%s0 + $0xe0] sm:$0xff]
  %v47 = vld [vmem:[%s0 + $0xf0] sm:$0xff]
  %v48 = vld [vmem:[%s0 + $0xf8] sm:$0xff]
  %v49 = vld [vmem:[%s0 + $0x108] sm:$0xff]
  %v50 = vld [vmem:[%s0 + $0x110] sm:$0xff]
  %v51 = vld [vmem:[%s0 + $0x120] sm:$0xff]
  %v52 = vld [vmem:[%s0 + $0x128] sm:$0xff]
  %v53 = vld [vmem:[%s0 + $0x138] sm:$0xff]
  %v54 = vld [vmem:[%s0 + $0x140] sm:$0xff]
  %v55 = vld [vmem:[%s0 + $0x150] sm:$0xff]
  %v56 = vld [vmem:[%s0 + $0x158] sm:$0xff]
  %v57 = vld [vmem:[%s0 + $0x168] sm:$0xff]
  %v58 = vld [vmem:[%s0 + $0x170] sm:$0xff]
  %v59 = vld [vmem:[%s0 + $0x1b0] sm:$0xff]
  %v60 = vld [vmem:[%s0 + $0x1b8] sm:$0xff]
  %v61 = vld [vmem:[%s0 + $0x1c8] sm:$0xff]
  %v62 = vld [vmem:[%s0 + $0x1d0] sm:$0xff]
  %v63 = vld [vmem:[%s0 + $0x1e0] sm:$0xff]
  %v64 = vld [vmem:[%s0 + $0x1e8] sm:$0xff]
  %v65 = vld [vmem:[%s0 + $0x1f8] sm:$0xff]
  %v66 = vld [vmem:[%s0 + $0x200] sm:$0xff]
  %v67 = vld [vmem:[%s0 + $0x210] sm:$0xff]
  %v68 = vld [vmem:[%s0 + $0x218] sm:$0xff]
  %v69 = vld [vmem:[%s0 + $0x228] sm:$0xff]
  %v70 = vld [vmem:[%s0 + $0x230] sm:$0xff]
  %v71 = vld [vmem:[%s0 + $0x240] sm:$0xff]
  %v72 = vld [vmem:[%s0 + $0x248] sm:$0xff]
  %v73 = vld [vmem:[%s0 + $0x258] sm:$0xff]
  %v74 = vld [vmem:[%s0 + $0x260] sm:$0xff]
  %v75 = vld [vmem:[%s0 + $0x270] sm:$0xff]
  %v76 = vld [vmem:[%s0 + $0x278] sm:$0xff]
  %v77 = vld [vmem:[%s0 + $0x288] sm:$0xff]
  %v78 = vld [vmem:[%s0 + $0x290] sm:$0xff]
  %v79 = vld [vmem:[%s0 + $0x2a0] sm:$0xff]
  %v80 = vld [vmem:[%s0 + $0x2a8] sm:$0xff]
  %v81 = vld [vmem:[%s0 + $0x2b8] sm:$0xff]
  %v82 = vld [vmem:[%s0 + $0x2c0] sm:$0xff]
  %v83 = vld [vmem:[%s0 + $0x2d0] sm:$0xff]
  %v84 = vld [vmem:[%s0 + $0x2d8] sm:$0xff]
  %v85 = vld [vmem:[%s0 + $0x2e8] sm:$0xff]
  %v86 = vld [vmem:[%s0 + $0x2f0] sm:$0xff]
  %v87 = vld [vmem:[%s0 + $0x300] sm:$0xff]
  %v88 = vld [vmem:[%s0 + $0x308] sm:$0xff]
  %v89 = vld [vmem:[%s0 + $0x318] sm:$0xff]
  %v90 = vld [vmem:[%s0 + $0x320] sm:$0xff]
  %v91 = vld [vmem:[%s1] sm:$0xf]
  %v92 = vld [vmem:[%s0 + $0x1] sm:$0xff]
  %v93 = vld [vmem:[%s0 + $0x9] sm:$0xff]
  %v94 = vld [vmem:[%s0 + $0x19] sm:$0xff]
  %v95 = vld [vmem:[%s0 + $0x21] sm:$0xff]
  %v96 = vld [vmem:[%s0 + $0x31] sm:$0xff]
  %v97 = vld [vmem:[%s0 + $0x39] sm:$0xff]
  %v98 = vld [vmem:[%s0 + $0x49] sm:$0xff]
  %v99 = vld [vmem:[%s0 + $0x51] sm:$0xff]
  %v100 = vld [vmem:[%s0 + $0x61] sm:$0xff]
  %v101 = vld [vmem:[%s0 + $0x69] sm:$0xff]
  %v102 = vld [vmem:[%s0 + $0x79] sm:$0xff]
  %v103 = vld [vmem:[%s0 + $0x81] sm:$0xff]
  %v104 = vld [vmem:[%s0 + $0x91] sm:$0xff]
  %v105 = vld [vmem:[%s0 + $0x99] sm:$0xff]
  %v106 = vld [vmem:[%s0 + $0xa9] sm:$0xff]
  %v107 = vld [vmem:[%s0 + $0xb1] sm:$0xff]
  %v108 = vld [vmem:[%s0 + $0xc1] sm:$0xff]
  %v109 = vld [vmem:[%s0 + $0xc9] sm:$0xff]
  %v110 = vld [vmem:[%s0 + $0xd9] sm:$0xff]
  %v111 = vld [vmem:[%s0 + $0xe1] sm:$0xff]
  %v112 = vld [vmem:[%s0 + $0xf1] sm:$0xff]
  %v113 = vld [vmem:[%s0 + $0xf9] sm:$0xff]
  %v114 = vld [vmem:[%s0 + $0x109] sm:$0xff]
  %v115 = vld [vmem:[%s0 + $0x111] sm:$0xff]
  %v116 = vld [vmem:[%s0 + $0x121] sm:$0xff]
  %v117 = vld [vmem:[%s0 + $0x129] sm:$0xff]
  %v118 = vld [vmem:[%s0 + $0x139] sm:$0xff]
  %v119 = vld [vmem:[%s0 + $0x141] sm:$0xff]
  %v120 = vld [vmem:[%s0 + $0x151] sm:$0xff]
  %v121 = vld [vmem:[%s0 + $0x159] sm:$0xff]
  %v122 = vld [vmem:[%s0 + $0x169] sm:$0xff]
  %v123 = vld [vmem:[%s0 + $0x171] sm:$0xff]
  %v124 = vld [vmem:[%s0 + $0x1b1] sm:$0xff]
  %v125 = vld [vmem:[%s0 + $0x1b9] sm:$0xff]
  %v126 = vld [vmem:[%s0 + $0x1c9] sm:$0xff]
  %v127 = vld [vmem:[%s0 + $0x1d1] sm:$0xff]
  %v128 = vld [vmem:[%s0 + $0x1e1] sm:$0xff]
  %v129 = vld [vmem:[%s0 + $0x1e9] sm:$0xff]
  %v130 = vld [vmem:[%s0 + $0x1f9] sm:$0xff]
  %v131 = vld [vmem:[%s0 + $0x201] sm:$0xff]
  %v132 = vld [vmem:[%s0 + $0x211] sm:$0xff]
  %v133 = vld [vmem:[%s0 + $0x219] sm:$0xff]
  %v134 = vld [vmem:[%s0 + $0x229] sm:$0xff]
  %v135 = vld [vmem:[%s0 + $0x231] sm:$0xff]
  %v136 = vld [vmem:[%s0 + $0x241] sm:$0xff]
  %v137 = vld [vmem:[%s0 + $0x249] sm:$0xff]
  %v138 = vld [vmem:[%s0 + $0x259] sm:$0xff]
  %v139 = vld [vmem:[%s0 + $0x261] sm:$0xff]
  %v140 = vld [vmem:[%s0 + $0x271] sm:$0xff]
  %v141 = vld [vmem:[%s0 + $0x279] sm:$0xff]
  %v142 = vld [vmem:[%s0 + $0x289] sm:$0xff]
  %v143 = vld [vmem:[%s0 + $0x291] sm:$0xff]
  %v144 = vld [vmem:[%s0 + $0x2a1] sm:$0xff]
  %v145 = vld [vmem:[%s0 + $0x2a9] sm:$0xff]
  %v146 = vld [vmem:[%s0 + $0x2b9] sm:$0xff]
  %v147 = vld [vmem:[%s0 + $0x2c1] sm:$0xff]
  %v148 = vld [vmem:[%s0 + $0x2d1] sm:$0xff]
  %v149 = vld [vmem:[%s0 + $0x2d9] sm:$0xff]
  %v150 = vld [vmem:[%s0 + $0x2e9] sm:$0xff]
  %v151 = vld [vmem:[%s0 + $0x2f1] sm:$0xff]
  %v152 = vld [vmem:[%s0 + $0x301] sm:$0xff]
  %v153 = vld [vmem:[%s0 + $0x309] sm:$0xff]
  %v154 = vld [vmem:[%s0 + $0x319] sm:$0xff]
  %v155 = vld [vmem:[%s0 + $0x321] sm:$0xff]
  %s156 = scalar_lea.vmem %s1, 4
  %v157 = vld [vmem:[%s156] sm:$0xf]
  %vm158 = vcmask 31744
  %v160 = vsel %vm158, %v92, 0
  %v163 = vsel %vm158, %v93, 0
  %v166 = vsel %vm158, %v94, 0
  %v169 = vsel %vm158, %v95, 0
  %v172 = vsel %vm158, %v96, 0
  %v175 = vsel %vm158, %v97, 0
  %v178 = vsel %vm158, %v98, 0
  %v181 = vsel %vm158, %v99, 0
  %v184 = vsel %vm158, %v100, 0
  %v187 = vsel %vm158, %v101, 0
  %v190 = vsel %vm158, %v102, 0
  %v193 = vsel %vm158, %v103, 0
  %v196 = vsel %vm158, %v104, 0
  %v199 = vsel %vm158, %v105, 0
  %v202 = vsel %vm158, %v106, 0
  %v205 = vsel %vm158, %v107, 0
  %v208 = vsel %vm158, %v108, 0
  %v211 = vsel %vm158, %v109, 0
  %v214 = vsel %vm158, %v110, 0
  %v217 = vsel %vm158, %v111, 0
  %v220 = vsel %vm158, %v112, 0
  %v223 = vsel %vm158, %v113, 0
  %v226 = vsel %vm158, %v114, 0
  %v229 = vsel %vm158, %v115, 0
  %v232 = vsel %vm158, %v116, 0
  %v235 = vsel %vm158, %v117, 0
  %v238 = vsel %vm158, %v118, 0
  %v241 = vsel %vm158, %v119, 0
  %v244 = vsel %vm158, %v120, 0
  %v247 = vsel %vm158, %v121, 0
  %v250 = vsel %vm158, %v122, 0
  %v253 = vsel %vm158, %v123, 0
  %v256 = vsel %vm158, %v124, 0
  %v259 = vsel %vm158, %v125, 0
  %v262 = vsel %vm158, %v126, 0
  %v265 = vsel %vm158, %v127, 0
  %v268 = vsel %vm158, %v128, 0
  %v271 = vsel %vm158, %v129, 0
  %v274 = vsel %vm158, %v130, 0
  %v277 = vsel %vm158, %v131, 0
  %v280 = vsel %vm158, %v132, 0
  %v283 = vsel %vm158, %v133, 0
  %v286 = vsel %vm158, %v134, 0
  %v289 = vsel %vm158, %v135, 0
  %v292 = vsel %vm158, %v136, 0
  %v295 = vsel %vm158, %v137, 0
  %v298 = vsel %vm158, %v138, 0
  %v301 = vsel %vm158, %v139, 0
  %v304 = vsel %vm158, %v140, 0
  %v307 = vsel %vm158, %v141, 0
  %v310 = vsel %vm158, %v142, 0
  %v313 = vsel %vm158, %v143, 0
  %v316 = vsel %vm158, %v144, 0
  %v319 = vsel %vm158, %v145, 0
  %v322 = vsel %vm158, %v146, 0
  %v325 = vsel %vm158, %v147, 0
  %v328 = vsel %vm158, %v148, 0
  %v331 = vsel %vm158, %v149, 0
  %v334 = vsel %vm158, %v150, 0
  %v337 = vsel %vm158, %v151, 0
  %v340 = vsel %vm158, %v152, 0
  %v343 = vsel %vm158, %v153, 0
  %v346 = vsel %vm158, %v154, 0
  %v349 = vsel %vm158, %v155, 0
  %vm351 = vcmask 1043456
  %v353 = vsel %vm351, %v157, 0
  %355 = vmatprep.subr.mxu0 0.0
  %356 = vmatpush1.msra.mxu0 0.0
  %357 = vmatprep.subr.mxu0 0.0
  %358 = vmatpush1.msra.mxu0 0.0
  %359 = vmatprep.subr.mxu0 0.0
  %360 = vmatpush1.msra.mxu0 0.0
  %361 = vmatprep.subr.mxu0 0.0
  %362 = vmatpush1.msra.mxu0 0.0
  %363 = vmatprep.subr.mxu0 0.0
  %364 = vmatpush1.msra.mxu0 0.0
  %365 = vmatprep.subr.mxu0 0.0
  %366 = vmatpush1.msra.mxu0 0.0
  %367 = vmatprep.subr.mxu0 0.0
  %368 = vmatpush1.msra.mxu0 0.0
  %369 = vmatprep.subr.mxu0 0.0
  %370 = vmatpush1.msra.mxu0 0.0
  %371 = vmatprep.subr.mxu0 0.0
  %372 = vmatpush1.msra.mxu0 0.0
  %373 = vmatprep.subr.mxu0 0.0
  %374 = vmatpush1.msra.mxu0 0.0
  %375 = vmatprep.subr.mxu0 0.0
  %376 = vmatpush1.msra.mxu0 0.0
  %377 = vmatprep.subr.mxu0 0.0
  %378 = vmatpush1.msra.mxu0 0.0
  %379 = vmatprep.subr.mxu0 0.0
  %380 = vmatpush1.msra.mxu0 0.0
  %381 = vmatprep.subr.mxu0 0.0
  %382 = vmatpush1.msra.mxu0 0.0
  %383 = vmatprep.subr.mxu0 0.0
  %384 = vmatpush1.msra.mxu0 0.0
  %385 = vmatprep.subr.mxu0 0.0
  %386 = vmatpush1.msra.mxu0 %v353
  %387 = vmatprep.subr.mxu0 0.0
  %388 = vmatpush2.msra.mxu0 0.0
  %389 = vmatprep.subr.mxu0 0.0
  %390 = vmatpush2.msra.mxu0 0.0
  %391 = vmatprep.subr.mxu0 0.0
  %392 = vmatpush2.msra.mxu0 0.0
  %393 = vmatprep.subr.mxu0 0.0
  %394 = vmatpush2.msra.mxu0 0.0
  %395 = vmatprep.subr.mxu0 0.0
  %396 = vmatpush2.msra.mxu0 0.0
  %397 = vmatprep.subr.mxu0 0.0
  %398 = vmatpush2.msra.mxu0 0.0
  %399 = vmatprep.subr.mxu0 0.0
  %400 = vmatpush2.msra.mxu0 0.0
  %401 = vmatprep.subr.mxu0 0.0
  %402 = vmatpush2.msra.mxu0 0.0
  %403 = vmatprep.subr.mxu0 0.0
  %404 = vmatpush2.msra.mxu0 0.0
  %405 = vmatprep.subr.mxu0 0.0
  %406 = vmatpush2.msra.mxu0 0.0
  %407 = vmatprep.subr.mxu0 0.0
  %408 = vmatpush2.msra.mxu0 0.0
  %409 = vmatprep.subr.mxu0 0.0
  %410 = vmatpush2.msra.mxu0 0.0
  %411 = vmatprep.subr.mxu0 0.0
  %412 = vmatpush2.msra.mxu0 0.0
  %413 = vmatprep.subr.mxu0 0.0
  %414 = vmatpush2.msra.mxu0 0.0
  %415 = vmatprep.subr.mxu0 0.0
  %416 = vmatpush2.msra.mxu0 0.0
  %417 = vmatprep.subr.mxu0 0.0
  %418 = vmatpush2.msra.mxu0 0.0
  %419 = vmatprep.mubr.f32.mxu0 0.0
  %420 = vmatmul.mubr.f32.gmra.mxu0 %v160
  %v421 = vpop.f32.mrf.mxu0
  %v422 = vadd.f32 0.0, %v421
  %v423 = vpop.f32.mrf.mxu0
  %424 = vmatprep.mubr.f32.mxu0 0.0
  %425 = vmatmul.mubr.f32.gmra.mxu0 %v163
  %v426 = vpop.f32.mrf.mxu0
  %v427 = vadd.f32 0.0, %v426
  %v428 = vpop.f32.mrf.mxu0
  %429 = vmatprep.mubr.f32.mxu0 0.0
  %430 = vmatmul.mubr.f32.gmra.mxu0 %v166
  %v431 = vpop.f32.mrf.mxu0
  %v432 = vadd.f32 0.0, %v431
  %v433 = vpop.f32.mrf.mxu0
  %434 = vmatprep.mubr.f32.mxu0 0.0
  %435 = vmatmul.mubr.f32.gmra.mxu0 %v169
  %v436 = vpop.f32.mrf.mxu0
  %v437 = vadd.f32 0.0, %v436
  %v438 = vpop.f32.mrf.mxu0
  %439 = vmatprep.mubr.f32.mxu0 0.0
  %440 = vmatmul.mubr.f32.gmra.mxu0 %v172
  %v441 = vpop.f32.mrf.mxu0
  %v442 = vadd.f32 0.0, %v441
  %v443 = vpop.f32.mrf.mxu0
  %444 = vmatprep.mubr.f32.mxu0 0.0
  %445 = vmatmul.mubr.f32.gmra.mxu0 %v175
  %v446 = vpop.f32.mrf.mxu0
  %v447 = vadd.f32 0.0, %v446
  %v448 = vpop.f32.mrf.mxu0
  %449 = vmatprep.mubr.f32.mxu0 0.0
  %450 = vmatmul.mubr.f32.gmra.mxu0 %v178
  %v451 = vpop.f32.mrf.mxu0
  %v452 = vadd.f32 0.0, %v451
  %v453 = vpop.f32.mrf.mxu0
  %454 = vmatprep.mubr.f32.mxu0 0.0
  %455 = vmatmul.mubr.f32.gmra.mxu0 %v181
  %v456 = vpop.f32.mrf.mxu0
  %v457 = vadd.f32 0.0, %v456
  %v458 = vpop.f32.mrf.mxu0
  %459 = vmatprep.mubr.f32.mxu0 0.0
  %460 = vmatmul.mubr.f32.gmra.mxu0 %v184
  %v461 = vpop.f32.mrf.mxu0
  %v462 = vadd.f32 0.0, %v461
  %v463 = vpop.f32.mrf.mxu0
  %464 = vmatprep.mubr.f32.mxu0 0.0
  %465 = vmatmul.mubr.f32.gmra.mxu0 %v187
  %v466 = vpop.f32.mrf.mxu0
  %v467 = vadd.f32 0.0, %v466
  %v468 = vpop.f32.mrf.mxu0
  %469 = vmatprep.mubr.f32.mxu0 0.0
  %470 = vmatmul.mubr.f32.gmra.mxu0 %v190
  %v471 = vpop.f32.mrf.mxu0
  %v472 = vadd.f32 0.0, %v471
  %v473 = vpop.f32.mrf.mxu0
  %474 = vmatprep.mubr.f32.mxu0 0.0
  %475 = vmatmul.mubr.f32.gmra.mxu0 %v193
  %v476 = vpop.f32.mrf.mxu0
  %v477 = vadd.f32 0.0, %v476
  %v478 = vpop.f32.mrf.mxu0
  %479 = vmatprep.mubr.f32.mxu0 0.0
  %480 = vmatmul.mubr.f32.gmra.mxu0 %v196
  %v481 = vpop.f32.mrf.mxu0
  %v482 = vadd.f32 0.0, %v481
  %v483 = vpop.f32.mrf.mxu0
  %484 = vmatprep.mubr.f32.mxu0 0.0
  %485 = vmatmul.mubr.f32.gmra.mxu0 %v199
  %v486 = vpop.f32.mrf.mxu0
  %v487 = vadd.f32 0.0, %v486
  %v488 = vpop.f32.mrf.mxu0
  %489 = vmatprep.mubr.f32.mxu0 0.0
  %490 = vmatmul.mubr.f32.gmra.mxu0 %v202
  %v491 = vpop.f32.mrf.mxu0
  %v492 = vadd.f32 0.0, %v491
  %v493 = vpop.f32.mrf.mxu0
  %494 = vmatprep.mubr.f32.mxu0 0.0
  %495 = vmatmul.mubr.f32.gmra.mxu0 %v205
  %v496 = vpop.f32.mrf.mxu0
  %v497 = vadd.f32 0.0, %v496
  %v498 = vpop.f32.mrf.mxu0
  %499 = vmatprep.mubr.f32.mxu0 0.0
  %500 = vmatmul.mubr.f32.gmra.mxu0 %v208
  %v501 = vpop.f32.mrf.mxu0
  %v502 = vadd.f32 0.0, %v501
  %v503 = vpop.f32.mrf.mxu0
  %504 = vmatprep.mubr.f32.mxu0 0.0
  %505 = vmatmul.mubr.f32.gmra.mxu0 %v211
  %v506 = vpop.f32.mrf.mxu0
  %v507 = vadd.f32 0.0, %v506
  %v508 = vpop.f32.mrf.mxu0
  %509 = vmatprep.mubr.f32.mxu0 0.0
  %510 = vmatmul.mubr.f32.gmra.mxu0 %v214
  %v511 = vpop.f32.mrf.mxu0
  %v512 = vadd.f32 0.0, %v511
  %v513 = vpop.f32.mrf.mxu0
  %514 = vmatprep.mubr.f32.mxu0 0.0
  %515 = vmatmul.mubr.f32.gmra.mxu0 %v217
  %v516 = vpop.f32.mrf.mxu0
  %v517 = vadd.f32 0.0, %v516
  %v518 = vpop.f32.mrf.mxu0
  %519 = vmatprep.mubr.f32.mxu0 0.0
  %520 = vmatmul.mubr.f32.gmra.mxu0 %v220
  %v521 = vpop.f32.mrf.mxu0
  %v522 = vadd.f32 0.0, %v521
  %v523 = vpop.f32.mrf.mxu0
  %524 = vmatprep.mubr.f32.mxu0 0.0
  %525 = vmatmul.mubr.f32.gmra.mxu0 %v223
  %v526 = vpop.f32.mrf.mxu0
  %v527 = vadd.f32 0.0, %v526
  %v528 = vpop.f32.mrf.mxu0
  %529 = vmatprep.mubr.f32.mxu0 0.0
  %530 = vmatmul.mubr.f32.gmra.mxu0 %v226
  %v531 = vpop.f32.mrf.mxu0
  %v532 = vadd.f32 0.0, %v531
  %v533 = vpop.f32.mrf.mxu0
  %534 = vmatprep.mubr.f32.mxu0 0.0
  %535 = vmatmul.mubr.f32.gmra.mxu0 %v229
  %v536 = vpop.f32.mrf.mxu0
  %v537 = vadd.f32 0.0, %v536
  %v538 = vpop.f32.mrf.mxu0
  %539 = vmatprep.mubr.f32.mxu0 0.0
  %540 = vmatmul.mubr.f32.gmra.mxu0 %v232
  %v541 = vpop.f32.mrf.mxu0
  %v542 = vadd.f32 0.0, %v541
  %v543 = vpop.f32.mrf.mxu0
  %544 = vmatprep.mubr.f32.mxu0 0.0
  %545 = vmatmul.mubr.f32.gmra.mxu0 %v235
  %v546 = vpop.f32.mrf.mxu0
  %v547 = vadd.f32 0.0, %v546
  %v548 = vpop.f32.mrf.mxu0
  %549 = vmatprep.mubr.f32.mxu0 0.0
  %550 = vmatmul.mubr.f32.gmra.mxu0 %v238
  %v551 = vpop.f32.mrf.mxu0
  %v552 = vadd.f32 0.0, %v551
  %v553 = vpop.f32.mrf.mxu0
  %554 = vmatprep.mubr.f32.mxu0 0.0
  %555 = vmatmul.mubr.f32.gmra.mxu0 %v241
  %v556 = vpop.f32.mrf.mxu0
  %v557 = vadd.f32 0.0, %v556
  %v558 = vpop.f32.mrf.mxu0
  %559 = vmatprep.mubr.f32.mxu0 0.0
  %560 = vmatmul.mubr.f32.gmra.mxu0 %v244
  %v561 = vpop.f32.mrf.mxu0
  %v562 = vadd.f32 0.0, %v561
  %v563 = vpop.f32.mrf.mxu0
  %564 = vmatprep.mubr.f32.mxu0 0.0
  %565 = vmatmul.mubr.f32.gmra.mxu0 %v247
  %v566 = vpop.f32.mrf.mxu0
  %v567 = vadd.f32 0.0, %v566
  %v568 = vpop.f32.mrf.mxu0
  %569 = vmatprep.mubr.f32.mxu0 0.0
  %570 = vmatmul.mubr.f32.gmra.mxu0 %v250
  %v571 = vpop.f32.mrf.mxu0
  %v572 = vadd.f32 0.0, %v571
  %v573 = vpop.f32.mrf.mxu0
  %574 = vmatprep.mubr.f32.mxu0 0.0
  %575 = vmatmul.mubr.f32.gmra.mxu0 %v253
  %v576 = vpop.f32.mrf.mxu0
  %v577 = vadd.f32 0.0, %v576
  %v578 = vpop.f32.mrf.mxu0
  %579 = vmatprep.mubr.f32.mxu0 0.0
  %580 = vmatmul.mubr.f32.gmra.mxu0 %v256
  %v581 = vpop.f32.mrf.mxu0
  %v582 = vadd.f32 0.0, %v581
  %v583 = vpop.f32.mrf.mxu0
  %584 = vmatprep.mubr.f32.mxu0 0.0
  %585 = vmatmul.mubr.f32.gmra.mxu0 %v259
  %v586 = vpop.f32.mrf.mxu0
  %v587 = vadd.f32 0.0, %v586
  %v588 = vpop.f32.mrf.mxu0
  %589 = vmatprep.mubr.f32.mxu0 0.0
  %590 = vmatmul.mubr.f32.gmra.mxu0 %v262
  %v591 = vpop.f32.mrf.mxu0
  %v592 = vadd.f32 0.0, %v591
  %v593 = vpop.f32.mrf.mxu0
  %594 = vmatprep.mubr.f32.mxu0 0.0
  %595 = vmatmul.mubr.f32.gmra.mxu0 %v265
  %v596 = vpop.f32.mrf.mxu0
  %v597 = vadd.f32 0.0, %v596
  %v598 = vpop.f32.mrf.mxu0
  %599 = vmatprep.mubr.f32.mxu0 0.0
  %600 = vmatmul.mubr.f32.gmra.mxu0 %v268
  %v601 = vpop.f32.mrf.mxu0
  %v602 = vadd.f32 0.0, %v601
  %v603 = vpop.f32.mrf.mxu0
  %604 = vmatprep.mubr.f32.mxu0 0.0
  %605 = vmatmul.mubr.f32.gmra.mxu0 %v271
  %v606 = vpop.f32.mrf.mxu0
  %v607 = vadd.f32 0.0, %v606
  %v608 = vpop.f32.mrf.mxu0
  %609 = vmatprep.mubr.f32.mxu0 0.0
  %610 = vmatmul.mubr.f32.gmra.mxu0 %v274
  %v611 = vpop.f32.mrf.mxu0
  %v612 = vadd.f32 0.0, %v611
  %v613 = vpop.f32.mrf.mxu0
  %614 = vmatprep.mubr.f32.mxu0 0.0
  %615 = vmatmul.mubr.f32.gmra.mxu0 %v277
  %v616 = vpop.f32.mrf.mxu0
  %v617 = vadd.f32 0.0, %v616
  %v618 = vpop.f32.mrf.mxu0
  %619 = vmatprep.mubr.f32.mxu0 0.0
  %620 = vmatmul.mubr.f32.gmra.mxu0 %v280
  %v621 = vpop.f32.mrf.mxu0
  %v622 = vadd.f32 0.0, %v621
  %v623 = vpop.f32.mrf.mxu0
  %624 = vmatprep.mubr.f32.mxu0 0.0
  %625 = vmatmul.mubr.f32.gmra.mxu0 %v283
  %v626 = vpop.f32.mrf.mxu0
  %v627 = vadd.f32 0.0, %v626
  %v628 = vpop.f32.mrf.mxu0
  %629 = vmatprep.mubr.f32.mxu0 0.0
  %630 = vmatmul.mubr.f32.gmra.mxu0 %v286
  %v631 = vpop.f32.mrf.mxu0
  %v632 = vadd.f32 0.0, %v631
  %v633 = vpop.f32.mrf.mxu0
  %634 = vmatprep.mubr.f32.mxu0 0.0
  %635 = vmatmul.mubr.f32.gmra.mxu0 %v289
  %v636 = vpop.f32.mrf.mxu0
  %v637 = vadd.f32 0.0, %v636
  %v638 = vpop.f32.mrf.mxu0
  %639 = vmatprep.mubr.f32.mxu0 0.0
  %640 = vmatmul.mubr.f32.gmra.mxu0 %v292
  %v641 = vpop.f32.mrf.mxu0
  %v642 = vadd.f32 0.0, %v641
  %v643 = vpop.f32.mrf.mxu0
  %644 = vmatprep.mubr.f32.mxu0 0.0
  %645 = vmatmul.mubr.f32.gmra.mxu0 %v295
  %v646 = vpop.f32.mrf.mxu0
  %v647 = vadd.f32 0.0, %v646
  %v648 = vpop.f32.mrf.mxu0
  %649 = vmatprep.mubr.f32.mxu0 0.0
  %650 = vmatmul.mubr.f32.gmra.mxu0 %v298
  %v651 = vpop.f32.mrf.mxu0
  %v652 = vadd.f32 0.0, %v651
  %v653 = vpop.f32.mrf.mxu0
  %654 = vmatprep.mubr.f32.mxu0 0.0
  %655 = vmatmul.mubr.f32.gmra.mxu0 %v301
  %v656 = vpop.f32.mrf.mxu0
  %v657 = vadd.f32 0.0, %v656
  %v658 = vpop.f32.mrf.mxu0
  %659 = vmatprep.mubr.f32.mxu0 0.0
  %660 = vmatmul.mubr.f32.gmra.mxu0 %v304
  %v661 = vpop.f32.mrf.mxu0
  %v662 = vadd.f32 0.0, %v661
  %v663 = vpop.f32.mrf.mxu0
  %664 = vmatprep.mubr.f32.mxu0 0.0
  %665 = vmatmul.mubr.f32.gmra.mxu0 %v307
  %v666 = vpop.f32.mrf.mxu0
  %v667 = vadd.f32 0.0, %v666
  %v668 = vpop.f32.mrf.mxu0
  %669 = vmatprep.mubr.f32.mxu0 0.0
  %670 = vmatmul.mubr.f32.gmra.mxu0 %v310
  %v671 = vpop.f32.mrf.mxu0
  %v672 = vadd.f32 0.0, %v671
  %v673 = vpop.f32.mrf.mxu0
  %674 = vmatprep.mubr.f32.mxu0 0.0
  %675 = vmatmul.mubr.f32.gmra.mxu0 %v313
  %v676 = vpop.f32.mrf.mxu0
  %v677 = vadd.f32 0.0, %v676
  %v678 = vpop.f32.mrf.mxu0
  %679 = vmatprep.mubr.f32.mxu0 0.0
  %680 = vmatmul.mubr.f32.gmra.mxu0 %v316
  %v681 = vpop.f32.mrf.mxu0
  %v682 = vadd.f32 0.0, %v681
  %v683 = vpop.f32.mrf.mxu0
  %684 = vmatprep.mubr.f32.mxu0 0.0
  %685 = vmatmul.mubr.f32.gmra.mxu0 %v319
  %v686 = vpop.f32.mrf.mxu0
  %v687 = vadd.f32 0.0, %v686
  %v688 = vpop.f32.mrf.mxu0
  %689 = vmatprep.mubr.f32.mxu0 0.0
  %690 = vmatmul.mubr.f32.gmra.mxu0 %v322
  %v691 = vpop.f32.mrf.mxu0
  %v692 = vadd.f32 0.0, %v691
  %v693 = vpop.f32.mrf.mxu0
  %694 = vmatprep.mubr.f32.mxu0 0.0
  %695 = vmatmul.mubr.f32.gmra.mxu0 %v325
  %v696 = vpop.f32.mrf.mxu0
  %v697 = vadd.f32 0.0, %v696
  %v698 = vpop.f32.mrf.mxu0
  %699 = vmatprep.mubr.f32.mxu0 0.0
  %700 = vmatmul.mubr.f32.gmra.mxu0 %v328
  %v701 = vpop.f32.mrf.mxu0
  %v702 = vadd.f32 0.0, %v701
  %v703 = vpop.f32.mrf.mxu0
  %704 = vmatprep.mubr.f32.mxu0 0.0
  %705 = vmatmul.mubr.f32.gmra.mxu0 %v331
  %v706 = vpop.f32.mrf.mxu0
  %v707 = vadd.f32 0.0, %v706
  %v708 = vpop.f32.mrf.mxu0
  %709 = vmatprep.mubr.f32.mxu0 0.0
  %710 = vmatmul.mubr.f32.gmra.mxu0 %v334
  %v711 = vpop.f32.mrf.mxu0
  %v712 = vadd.f32 0.0, %v711
  %v713 = vpop.f32.mrf.mxu0
  %714 = vmatprep.mubr.f32.mxu0 0.0
  %715 = vmatmul.mubr.f32.gmra.mxu0 %v337
  %v716 = vpop.f32.mrf.mxu0
  %v717 = vadd.f32 0.0, %v716
  %v718 = vpop.f32.mrf.mxu0
  %719 = vmatprep.mubr.f32.mxu0 0.0
  %720 = vmatmul.mubr.f32.gmra.mxu0 %v340
  %v721 = vpop.f32.mrf.mxu0
  %v722 = vadd.f32 0.0, %v721
  %v723 = vpop.f32.mrf.mxu0
  %724 = vmatprep.mubr.f32.mxu0 0.0
  %725 = vmatmul.mubr.f32.gmra.mxu0 %v343
  %v726 = vpop.f32.mrf.mxu0
  %v727 = vadd.f32 0.0, %v726
  %v728 = vpop.f32.mrf.mxu0
  %729 = vmatprep.mubr.f32.mxu0 0.0
  %730 = vmatmul.mubr.f32.gmra.mxu0 %v346
  %v731 = vpop.f32.mrf.mxu0
  %v732 = vadd.f32 0.0, %v731
  %v733 = vpop.f32.mrf.mxu0
  %734 = vmatprep.mubr.f32.mxu0 0.0
  %735 = vmatmul.mubr.f32.gmra.mxu0 %v349
  %v736 = vpop.f32.mrf.mxu0
  %v737 = vadd.f32 0.0, %v736
  %v738 = vpop.f32.mrf.mxu0
  %739 = vdwg.mxu0
  %v741 = vsel %vm158, %v27, 0
  %v744 = vsel %vm158, %v28, 0
  %v747 = vsel %vm158, %v29, 0
  %v750 = vsel %vm158, %v30, 0
  %v753 = vsel %vm158, %v31, 0
  %v756 = vsel %vm158, %v32, 0
  %v759 = vsel %vm158, %v33, 0
  %v762 = vsel %vm158, %v34, 0
  %v765 = vsel %vm158, %v35, 0
  %v768 = vsel %vm158, %v36, 0
  %v771 = vsel %vm158, %v37, 0
  %v774 = vsel %vm158, %v38, 0
  %v777 = vsel %vm158, %v39, 0
  %v780 = vsel %vm158, %v40, 0
  %v783 = vsel %vm158, %v41, 0
  %v786 = vsel %vm158, %v42, 0
  %v789 = vsel %vm158, %v43, 0
  %v792 = vsel %vm158, %v44, 0
  %v795 = vsel %vm158, %v45, 0
  %v798 = vsel %vm158, %v46, 0
  %v801 = vsel %vm158, %v47, 0
  %v804 = vsel %vm158, %v48, 0
  %v807 = vsel %vm158, %v49, 0
  %v810 = vsel %vm158, %v50, 0
  %v813 = vsel %vm158, %v51, 0
  %v816 = vsel %vm158, %v52, 0
  %v819 = vsel %vm158, %v53, 0
  %v822 = vsel %vm158, %v54, 0
  %v825 = vsel %vm158, %v55, 0
  %v828 = vsel %vm158, %v56, 0
  %v831 = vsel %vm158, %v57, 0
  %v834 = vsel %vm158, %v58, 0
  %v837 = vsel %vm158, %v59, 0
  %v840 = vsel %vm158, %v60, 0
  %v843 = vsel %vm158, %v61, 0
  %v846 = vsel %vm158, %v62, 0
  %v849 = vsel %vm158, %v63, 0
  %v852 = vsel %vm158, %v64, 0
  %v855 = vsel %vm158, %v65, 0
  %v858 = vsel %vm158, %v66, 0
  %v861 = vsel %vm158, %v67, 0
  %v864 = vsel %vm158, %v68, 0
  %v867 = vsel %vm158, %v69, 0
  %v870 = vsel %vm158, %v70, 0
  %v873 = vsel %vm158, %v71, 0
  %v876 = vsel %vm158, %v72, 0
  %v879 = vsel %vm158, %v73, 0
  %v882 = vsel %vm158, %v74, 0
  %v885 = vsel %vm158, %v75, 0
  %v888 = vsel %vm158, %v76, 0
  %v891 = vsel %vm158, %v77, 0
  %v894 = vsel %vm158, %v78, 0
  %v897 = vsel %vm158, %v79, 0
  %v900 = vsel %vm158, %v80, 0
  %v903 = vsel %vm158, %v81, 0
  %v906 = vsel %vm158, %v82, 0
  %v909 = vsel %vm158, %v83, 0
  %v912 = vsel %vm158, %v84, 0
  %v915 = vsel %vm158, %v85, 0
  %v918 = vsel %vm158, %v86, 0
  %v921 = vsel %vm158, %v87, 0
  %v924 = vsel %vm158, %v88, 0
  %v927 = vsel %vm158, %v89, 0
  %v930 = vsel %vm158, %v90, 0
  %v933 = vsel %vm351, %v91, 0
  %935 = vmatprep.subr.mxu0 0.0
  %936 = vmatpush1.msra.mxu0 0.0
  %937 = vmatprep.subr.mxu0 0.0
  %938 = vmatpush1.msra.mxu0 0.0
  %939 = vmatprep.subr.mxu0 0.0
  %940 = vmatpush1.msra.mxu0 0.0
  %941 = vmatprep.subr.mxu0 0.0
  %942 = vmatpush1.msra.mxu0 0.0
  %943 = vmatprep.subr.mxu0 0.0
  %944 = vmatpush1.msra.mxu0 0.0
  %945 = vmatprep.subr.mxu0 0.0
  %946 = vmatpush1.msra.mxu0 0.0
  %947 = vmatprep.subr.mxu0 0.0
  %948 = vmatpush1.msra.mxu0 0.0
  %949 = vmatprep.subr.mxu0 0.0
  %950 = vmatpush1.msra.mxu0 0.0
  %951 = vmatprep.subr.mxu0 0.0
  %952 = vmatpush1.msra.mxu0 0.0
  %953 = vmatprep.subr.mxu0 0.0
  %954 = vmatpush1.msra.mxu0 0.0
  %955 = vmatprep.subr.mxu0 0.0
  %956 = vmatpush1.msra.mxu0 0.0
  %957 = vmatprep.subr.mxu0 0.0
  %958 = vmatpush1.msra.mxu0 0.0
  %959 = vmatprep.subr.mxu0 0.0
  %960 = vmatpush1.msra.mxu0 0.0
  %961 = vmatprep.subr.mxu0 0.0
  %962 = vmatpush1.msra.mxu0 0.0
  %963 = vmatprep.subr.mxu0 0.0
  %964 = vmatpush1.msra.mxu0 0.0
  %965 = vmatprep.subr.mxu0 0.0
  %966 = vmatpush1.msra.mxu0 %v933
  %967 = vmatprep.subr.mxu0 0.0
  %968 = vmatpush2.msra.mxu0 0.0
  %969 = vmatprep.subr.mxu0 0.0
  %970 = vmatpush2.msra.mxu0 0.0
  %971 = vmatprep.subr.mxu0 0.0
  %972 = vmatpush2.msra.mxu0 0.0
  %973 = vmatprep.subr.mxu0 0.0
  %974 = vmatpush2.msra.mxu0 0.0
  %975 = vmatprep.subr.mxu0 0.0
  %976 = vmatpush2.msra.mxu0 0.0
  %977 = vmatprep.subr.mxu0 0.0
  %978 = vmatpush2.msra.mxu0 0.0
  %979 = vmatprep.subr.mxu0 0.0
  %980 = vmatpush2.msra.mxu0 0.0
  %981 = vmatprep.subr.mxu0 0.0
  %982 = vmatpush2.msra.mxu0 0.0
  %983 = vmatprep.subr.mxu0 0.0
  %984 = vmatpush2.msra.mxu0 0.0
  %985 = vmatprep.subr.mxu0 0.0
  %986 = vmatpush2.msra.mxu0 0.0
  %987 = vmatprep.subr.mxu0 0.0
  %988 = vmatpush2.msra.mxu0 0.0
  %989 = vmatprep.subr.mxu0 0.0
  %990 = vmatpush2.msra.mxu0 0.0
  %991 = vmatprep.subr.mxu0 0.0
  %992 = vmatpush2.msra.mxu0 0.0
  %993 = vmatprep.subr.mxu0 0.0
  %994 = vmatpush2.msra.mxu0 0.0
  %995 = vmatprep.subr.mxu0 0.0
  %996 = vmatpush2.msra.mxu0 0.0
  %997 = vmatprep.subr.mxu0 0.0
  %998 = vmatpush2.msra.mxu0 0.0
  %999 = vmatprep.mubr.f32.mxu0 0.0
  %1000 = vmatmul.mubr.f32.gmra.mxu0 %v741
  %v1001 = vpop.f32.mrf.mxu0
  %v1002 = vadd.f32 %v422, %v1001
  %v1003 = vpop.f32.mrf.mxu0
  %1004 = vmatprep.mubr.f32.mxu0 0.0
  %1005 = vmatmul.mubr.f32.gmra.mxu0 %v744
  %v1006 = vpop.f32.mrf.mxu0
  %v1007 = vadd.f32 %v427, %v1006
  %v1008 = vpop.f32.mrf.mxu0
  %1009 = vmatprep.mubr.f32.mxu0 0.0
  %1010 = vmatmul.mubr.f32.gmra.mxu0 %v747
  %v1011 = vpop.f32.mrf.mxu0
  %v1012 = vadd.f32 %v432, %v1011
  %v1013 = vpop.f32.mrf.mxu0
  %1014 = vmatprep.mubr.f32.mxu0 0.0
  %1015 = vmatmul.mubr.f32.gmra.mxu0 %v750
  %v1016 = vpop.f32.mrf.mxu0
  %v1017 = vadd.f32 %v437, %v1016
  %v1018 = vpop.f32.mrf.mxu0
  %1019 = vmatprep.mubr.f32.mxu0 0.0
  %1020 = vmatmul.mubr.f32.gmra.mxu0 %v753
  %v1021 = vpop.f32.mrf.mxu0
  %v1022 = vadd.f32 %v442, %v1021
  %v1023 = vpop.f32.mrf.mxu0
  %1024 = vmatprep.mubr.f32.mxu0 0.0
  %1025 = vmatmul.mubr.f32.gmra.mxu0 %v756
  %v1026 = vpop.f32.mrf.mxu0
  %v1027 = vadd.f32 %v447, %v1026
  %v1028 = vpop.f32.mrf.mxu0
  %1029 = vmatprep.mubr.f32.mxu0 0.0
  %1030 = vmatmul.mubr.f32.gmra.mxu0 %v759
  %v1031 = vpop.f32.mrf.mxu0
  %v1032 = vadd.f32 %v452, %v1031
  %v1033 = vpop.f32.mrf.mxu0
  %1034 = vmatprep.mubr.f32.mxu0 0.0
  %1035 = vmatmul.mubr.f32.gmra.mxu0 %v762
  %v1036 = vpop.f32.mrf.mxu0
  %v1037 = vadd.f32 %v457, %v1036
  %v1038 = vpop.f32.mrf.mxu0
  %1039 = vmatprep.mubr.f32.mxu0 0.0
  %1040 = vmatmul.mubr.f32.gmra.mxu0 %v765
  %v1041 = vpop.f32.mrf.mxu0
  %v1042 = vadd.f32 %v462, %v1041
  %v1043 = vpop.f32.mrf.mxu0
  %1044 = vmatprep.mubr.f32.mxu0 0.0
  %1045 = vmatmul.mubr.f32.gmra.mxu0 %v768
  %v1046 = vpop.f32.mrf.mxu0
  %v1047 = vadd.f32 %v467, %v1046
  %v1048 = vpop.f32.mrf.mxu0
  %1049 = vmatprep.mubr.f32.mxu0 0.0
  %1050 = vmatmul.mubr.f32.gmra.mxu0 %v771
  %v1051 = vpop.f32.mrf.mxu0
  %v1052 = vadd.f32 %v472, %v1051
  %v1053 = vpop.f32.mrf.mxu0
  %1054 = vmatprep.mubr.f32.mxu0 0.0
  %1055 = vmatmul.mubr.f32.gmra.mxu0 %v774
  %v1056 = vpop.f32.mrf.mxu0
  %v1057 = vadd.f32 %v477, %v1056
  %v1058 = vpop.f32.mrf.mxu0
  %1059 = vmatprep.mubr.f32.mxu0 0.0
  %1060 = vmatmul.mubr.f32.gmra.mxu0 %v777
  %v1061 = vpop.f32.mrf.mxu0
  %v1062 = vadd.f32 %v482, %v1061
  %v1063 = vpop.f32.mrf.mxu0
  %1064 = vmatprep.mubr.f32.mxu0 0.0
  %1065 = vmatmul.mubr.f32.gmra.mxu0 %v780
  %v1066 = vpop.f32.mrf.mxu0
  %v1067 = vadd.f32 %v487, %v1066
  %v1068 = vpop.f32.mrf.mxu0
  %1069 = vmatprep.mubr.f32.mxu0 0.0
  %1070 = vmatmul.mubr.f32.gmra.mxu0 %v783
  %v1071 = vpop.f32.mrf.mxu0
  %v1072 = vadd.f32 %v492, %v1071
  %v1073 = vpop.f32.mrf.mxu0
  %1074 = vmatprep.mubr.f32.mxu0 0.0
  %1075 = vmatmul.mubr.f32.gmra.mxu0 %v786
  %v1076 = vpop.f32.mrf.mxu0
  %v1077 = vadd.f32 %v497, %v1076
  %v1078 = vpop.f32.mrf.mxu0
  %1079 = vmatprep.mubr.f32.mxu0 0.0
  %1080 = vmatmul.mubr.f32.gmra.mxu0 %v789
  %v1081 = vpop.f32.mrf.mxu0
  %v1082 = vadd.f32 %v502, %v1081
  %v1083 = vpop.f32.mrf.mxu0
  %1084 = vmatprep.mubr.f32.mxu0 0.0
  %1085 = vmatmul.mubr.f32.gmra.mxu0 %v792
  %v1086 = vpop.f32.mrf.mxu0
  %v1087 = vadd.f32 %v507, %v1086
  %v1088 = vpop.f32.mrf.mxu0
  %1089 = vmatprep.mubr.f32.mxu0 0.0
  %1090 = vmatmul.mubr.f32.gmra.mxu0 %v795
  %v1091 = vpop.f32.mrf.mxu0
  %v1092 = vadd.f32 %v512, %v1091
  %v1093 = vpop.f32.mrf.mxu0
  %1094 = vmatprep.mubr.f32.mxu0 0.0
  %1095 = vmatmul.mubr.f32.gmra.mxu0 %v798
  %v1096 = vpop.f32.mrf.mxu0
  %v1097 = vadd.f32 %v517, %v1096
  %v1098 = vpop.f32.mrf.mxu0
  %1099 = vmatprep.mubr.f32.mxu0 0.0
  %1100 = vmatmul.mubr.f32.gmra.mxu0 %v801
  %v1101 = vpop.f32.mrf.mxu0
  %v1102 = vadd.f32 %v522, %v1101
  %v1103 = vpop.f32.mrf.mxu0
  %1104 = vmatprep.mubr.f32.mxu0 0.0
  %1105 = vmatmul.mubr.f32.gmra.mxu0 %v804
  %v1106 = vpop.f32.mrf.mxu0
  %v1107 = vadd.f32 %v527, %v1106
  %v1108 = vpop.f32.mrf.mxu0
  %1109 = vmatprep.mubr.f32.mxu0 0.0
  %1110 = vmatmul.mubr.f32.gmra.mxu0 %v807
  %v1111 = vpop.f32.mrf.mxu0
  %v1112 = vadd.f32 %v532, %v1111
  %v1113 = vpop.f32.mrf.mxu0
  %1114 = vmatprep.mubr.f32.mxu0 0.0
  %1115 = vmatmul.mubr.f32.gmra.mxu0 %v810
  %v1116 = vpop.f32.mrf.mxu0
  %v1117 = vadd.f32 %v537, %v1116
  %v1118 = vpop.f32.mrf.mxu0
  %1119 = vmatprep.mubr.f32.mxu0 0.0
  %1120 = vmatmul.mubr.f32.gmra.mxu0 %v813
  %v1121 = vpop.f32.mrf.mxu0
  %v1122 = vadd.f32 %v542, %v1121
  %v1123 = vpop.f32.mrf.mxu0
  %1124 = vmatprep.mubr.f32.mxu0 0.0
  %1125 = vmatmul.mubr.f32.gmra.mxu0 %v816
  %v1126 = vpop.f32.mrf.mxu0
  %v1127 = vadd.f32 %v547, %v1126
  %v1128 = vpop.f32.mrf.mxu0
  %1129 = vmatprep.mubr.f32.mxu0 0.0
  %1130 = vmatmul.mubr.f32.gmra.mxu0 %v819
  %v1131 = vpop.f32.mrf.mxu0
  %v1132 = vadd.f32 %v552, %v1131
  %v1133 = vpop.f32.mrf.mxu0
  %1134 = vmatprep.mubr.f32.mxu0 0.0
  %1135 = vmatmul.mubr.f32.gmra.mxu0 %v822
  %v1136 = vpop.f32.mrf.mxu0
  %v1137 = vadd.f32 %v557, %v1136
  %v1138 = vpop.f32.mrf.mxu0
  %1139 = vmatprep.mubr.f32.mxu0 0.0
  %1140 = vmatmul.mubr.f32.gmra.mxu0 %v825
  %v1141 = vpop.f32.mrf.mxu0
  %v1142 = vadd.f32 %v562, %v1141
  %v1143 = vpop.f32.mrf.mxu0
  %1144 = vmatprep.mubr.f32.mxu0 0.0
  %1145 = vmatmul.mubr.f32.gmra.mxu0 %v828
  %v1146 = vpop.f32.mrf.mxu0
  %v1147 = vadd.f32 %v567, %v1146
  %v1148 = vpop.f32.mrf.mxu0
  %1149 = vmatprep.mubr.f32.mxu0 0.0
  %1150 = vmatmul.mubr.f32.gmra.mxu0 %v831
  %v1151 = vpop.f32.mrf.mxu0
  %v1152 = vadd.f32 %v572, %v1151
  %v1153 = vpop.f32.mrf.mxu0
  %1154 = vmatprep.mubr.f32.mxu0 0.0
  %1155 = vmatmul.mubr.f32.gmra.mxu0 %v834
  %v1156 = vpop.f32.mrf.mxu0
  %v1157 = vadd.f32 %v577, %v1156
  %v1158 = vpop.f32.mrf.mxu0
  %1159 = vmatprep.mubr.f32.mxu0 0.0
  %1160 = vmatmul.mubr.f32.gmra.mxu0 %v837
  %v1161 = vpop.f32.mrf.mxu0
  %v1162 = vadd.f32 %v582, %v1161
  %v1163 = vpop.f32.mrf.mxu0
  %1164 = vmatprep.mubr.f32.mxu0 0.0
  %1165 = vmatmul.mubr.f32.gmra.mxu0 %v840
  %v1166 = vpop.f32.mrf.mxu0
  %v1167 = vadd.f32 %v587, %v1166
  %v1168 = vpop.f32.mrf.mxu0
  %1169 = vmatprep.mubr.f32.mxu0 0.0
  %1170 = vmatmul.mubr.f32.gmra.mxu0 %v843
  %v1171 = vpop.f32.mrf.mxu0
  %v1172 = vadd.f32 %v592, %v1171
  %v1173 = vpop.f32.mrf.mxu0
  %1174 = vmatprep.mubr.f32.mxu0 0.0
  %1175 = vmatmul.mubr.f32.gmra.mxu0 %v846
  %v1176 = vpop.f32.mrf.mxu0
  %v1177 = vadd.f32 %v597, %v1176
  %v1178 = vpop.f32.mrf.mxu0
  %1179 = vmatprep.mubr.f32.mxu0 0.0
  %1180 = vmatmul.mubr.f32.gmra.mxu0 %v849
  %v1181 = vpop.f32.mrf.mxu0
  %v1182 = vadd.f32 %v602, %v1181
  %v1183 = vpop.f32.mrf.mxu0
  %1184 = vmatprep.mubr.f32.mxu0 0.0
  %1185 = vmatmul.mubr.f32.gmra.mxu0 %v852
  %v1186 = vpop.f32.mrf.mxu0
  %v1187 = vadd.f32 %v607, %v1186
  %v1188 = vpop.f32.mrf.mxu0
  %1189 = vmatprep.mubr.f32.mxu0 0.0
  %1190 = vmatmul.mubr.f32.gmra.mxu0 %v855
  %v1191 = vpop.f32.mrf.mxu0
  %v1192 = vadd.f32 %v612, %v1191
  %v1193 = vpop.f32.mrf.mxu0
  %1194 = vmatprep.mubr.f32.mxu0 0.0
  %1195 = vmatmul.mubr.f32.gmra.mxu0 %v858
  %v1196 = vpop.f32.mrf.mxu0
  %v1197 = vadd.f32 %v617, %v1196
  %v1198 = vpop.f32.mrf.mxu0
  %1199 = vmatprep.mubr.f32.mxu0 0.0
  %1200 = vmatmul.mubr.f32.gmra.mxu0 %v861
  %v1201 = vpop.f32.mrf.mxu0
  %v1202 = vadd.f32 %v622, %v1201
  %v1203 = vpop.f32.mrf.mxu0
  %1204 = vmatprep.mubr.f32.mxu0 0.0
  %1205 = vmatmul.mubr.f32.gmra.mxu0 %v864
  %v1206 = vpop.f32.mrf.mxu0
  %v1207 = vadd.f32 %v627, %v1206
  %v1208 = vpop.f32.mrf.mxu0
  %1209 = vmatprep.mubr.f32.mxu0 0.0
  %1210 = vmatmul.mubr.f32.gmra.mxu0 %v867
  %v1211 = vpop.f32.mrf.mxu0
  %v1212 = vadd.f32 %v632, %v1211
  %v1213 = vpop.f32.mrf.mxu0
  %1214 = vmatprep.mubr.f32.mxu0 0.0
  %1215 = vmatmul.mubr.f32.gmra.mxu0 %v870
  %v1216 = vpop.f32.mrf.mxu0
  %v1217 = vadd.f32 %v637, %v1216
  %v1218 = vpop.f32.mrf.mxu0
  %1219 = vmatprep.mubr.f32.mxu0 0.0
  %1220 = vmatmul.mubr.f32.gmra.mxu0 %v873
  %v1221 = vpop.f32.mrf.mxu0
  %v1222 = vadd.f32 %v642, %v1221
  %v1223 = vpop.f32.mrf.mxu0
  %1224 = vmatprep.mubr.f32.mxu0 0.0
  %1225 = vmatmul.mubr.f32.gmra.mxu0 %v876
  %v1226 = vpop.f32.mrf.mxu0
  %v1227 = vadd.f32 %v647, %v1226
  %v1228 = vpop.f32.mrf.mxu0
  %1229 = vmatprep.mubr.f32.mxu0 0.0
  %1230 = vmatmul.mubr.f32.gmra.mxu0 %v879
  %v1231 = vpop.f32.mrf.mxu0
  %v1232 = vadd.f32 %v652, %v1231
  %v1233 = vpop.f32.mrf.mxu0
  %1234 = vmatprep.mubr.f32.mxu0 0.0
  %1235 = vmatmul.mubr.f32.gmra.mxu0 %v882
  %v1236 = vpop.f32.mrf.mxu0
  %v1237 = vadd.f32 %v657, %v1236
  %v1238 = vpop.f32.mrf.mxu0
  %1239 = vmatprep.mubr.f32.mxu0 0.0
  %1240 = vmatmul.mubr.f32.gmra.mxu0 %v885
  %v1241 = vpop.f32.mrf.mxu0
  %v1242 = vadd.f32 %v662, %v1241
  %v1243 = vpop.f32.mrf.mxu0
  %1244 = vmatprep.mubr.f32.mxu0 0.0
  %1245 = vmatmul.mubr.f32.gmra.mxu0 %v888
  %v1246 = vpop.f32.mrf.mxu0
  %v1247 = vadd.f32 %v667, %v1246
  %v1248 = vpop.f32.mrf.mxu0
  %1249 = vmatprep.mubr.f32.mxu0 0.0
  %1250 = vmatmul.mubr.f32.gmra.mxu0 %v891
  %v1251 = vpop.f32.mrf.mxu0
  %v1252 = vadd.f32 %v672, %v1251
  %v1253 = vpop.f32.mrf.mxu0
  %1254 = vmatprep.mubr.f32.mxu0 0.0
  %1255 = vmatmul.mubr.f32.gmra.mxu0 %v894
  %v1256 = vpop.f32.mrf.mxu0
  %v1257 = vadd.f32 %v677, %v1256
  %v1258 = vpop.f32.mrf.mxu0
  %1259 = vmatprep.mubr.f32.mxu0 0.0
  %1260 = vmatmul.mubr.f32.gmra.mxu0 %v897
  %v1261 = vpop.f32.mrf.mxu0
  %v1262 = vadd.f32 %v682, %v1261
  %v1263 = vpop.f32.mrf.mxu0
  %1264 = vmatprep.mubr.f32.mxu0 0.0
  %1265 = vmatmul.mubr.f32.gmra.mxu0 %v900
  %v1266 = vpop.f32.mrf.mxu0
  %v1267 = vadd.f32 %v687, %v1266
  %v1268 = vpop.f32.mrf.mxu0
  %1269 = vmatprep.mubr.f32.mxu0 0.0
  %1270 = vmatmul.mubr.f32.gmra.mxu0 %v903
  %v1271 = vpop.f32.mrf.mxu0
  %v1272 = vadd.f32 %v692, %v1271
  %v1273 = vpop.f32.mrf.mxu0
  %1274 = vmatprep.mubr.f32.mxu0 0.0
  %1275 = vmatmul.mubr.f32.gmra.mxu0 %v906
  %v1276 = vpop.f32.mrf.mxu0
  %v1277 = vadd.f32 %v697, %v1276
  %v1278 = vpop.f32.mrf.mxu0
  %1279 = vmatprep.mubr.f32.mxu0 0.0
  %1280 = vmatmul.mubr.f32.gmra.mxu0 %v909
  %v1281 = vpop.f32.mrf.mxu0
  %v1282 = vadd.f32 %v702, %v1281
  %v1283 = vpop.f32.mrf.mxu0
  %1284 = vmatprep.mubr.f32.mxu0 0.0
  %1285 = vmatmul.mubr.f32.gmra.mxu0 %v912
  %v1286 = vpop.f32.mrf.mxu0
  %v1287 = vadd.f32 %v707, %v1286
  %v1288 = vpop.f32.mrf.mxu0
  %1289 = vmatprep.mubr.f32.mxu0 0.0
  %1290 = vmatmul.mubr.f32.gmra.mxu0 %v915
  %v1291 = vpop.f32.mrf.mxu0
  %v1292 = vadd.f32 %v712, %v1291
  %v1293 = vpop.f32.mrf.mxu0
  %1294 = vmatprep.mubr.f32.mxu0 0.0
  %1295 = vmatmul.mubr.f32.gmra.mxu0 %v918
  %v1296 = vpop.f32.mrf.mxu0
  %v1297 = vadd.f32 %v717, %v1296
  %v1298 = vpop.f32.mrf.mxu0
  %1299 = vmatprep.mubr.f32.mxu0 0.0
  %1300 = vmatmul.mubr.f32.gmra.mxu0 %v921
  %v1301 = vpop.f32.mrf.mxu0
  %v1302 = vadd.f32 %v722, %v1301
  %v1303 = vpop.f32.mrf.mxu0
  %1304 = vmatprep.mubr.f32.mxu0 0.0
  %1305 = vmatmul.mubr.f32.gmra.mxu0 %v924
  %v1306 = vpop.f32.mrf.mxu0
  %v1307 = vadd.f32 %v727, %v1306
  %v1308 = vpop.f32.mrf.mxu0
  %1309 = vmatprep.mubr.f32.mxu0 0.0
  %1310 = vmatmul.mubr.f32.gmra.mxu0 %v927
  %v1311 = vpop.f32.mrf.mxu0
  %v1312 = vadd.f32 %v732, %v1311
  %v1313 = vpop.f32.mrf.mxu0
  %1314 = vmatprep.mubr.f32.mxu0 0.0
  %1315 = vmatmul.mubr.f32.gmra.mxu0 %v930
  %v1316 = vpop.f32.mrf.mxu0
  %v1317 = vadd.f32 %v737, %v1316
  %v1318 = vpop.f32.mrf.mxu0
  %1319 = vdwg.mxu0
  %v1320 = vld [vmem:[%s0 + $0x2] sm:$0xff]
  %v1321 = vld [vmem:[%s0 + $0xa] sm:$0xff]
  %v1322 = vld [vmem:[%s0 + $0x1a] sm:$0xff]
  %v1323 = vld [vmem:[%s0 + $0x22] sm:$0xff]
  %v1324 = vld [vmem:[%s0 + $0x32] sm:$0xff]
  %v1325 = vld [vmem:[%s0 + $0x3a] sm:$0xff]
  %v1326 = vld [vmem:[%s0 + $0x4a] sm:$0xff]
  %v1327 = vld [vmem:[%s0 + $0x52] sm:$0xff]
  %v1328 = vld [vmem:[%s0 + $0x62] sm:$0xff]
  %v1329 = vld [vmem:[%s0 + $0x6a] sm:$0xff]
  %v1330 = vld [vmem:[%s0 + $0x7a] sm:$0xff]
  %v1331 = vld [vmem:[%s0 + $0x82] sm:$0xff]
  %v1332 = vld [vmem:[%s0 + $0x92] sm:$0xff]
  %v1333 = vld [vmem:[%s0 + $0x9a] sm:$0xff]
  %v1334 = vld [vmem:[%s0 + $0xaa] sm:$0xff]
  %v1335 = vld [vmem:[%s0 + $0xb2] sm:$0xff]
  %v1336 = vld [vmem:[%s0 + $0xc2] sm:$0xff]
  %v1337 = vld [vmem:[%s0 + $0xca] sm:$0xff]
  %v1338 = vld [vmem:[%s0 + $0xda] sm:$0xff]
  %v1339 = vld [vmem:[%s0 + $0xe2] sm:$0xff]
  %v1340 = vld [vmem:[%s0 + $0xf2] sm:$0xff]
  %v1341 = vld [vmem:[%s0 + $0xfa] sm:$0xff]
  %v1342 = vld [vmem:[%s0 + $0x10a] sm:$0xff]
  %v1343 = vld [vmem:[%s0 + $0x112] sm:$0xff]
  %v1344 = vld [vmem:[%s0 + $0x122] sm:$0xff]
  %v1345 = vld [vmem:[%s0 + $0x12a] sm:$0xff]
  %v1346 = vld [vmem:[%s0 + $0x13a] sm:$0xff]
  %v1347 = vld [vmem:[%s0 + $0x142] sm:$0xff]
  %v1348 = vld [vmem:[%s0 + $0x152] sm:$0xff]
  %v1349 = vld [vmem:[%s0 + $0x15a] sm:$0xff]
  %v1350 = vld [vmem:[%s0 + $0x16a] sm:$0xff]
  %v1351 = vld [vmem:[%s0 + $0x172] sm:$0xff]
  %v1352 = vld [vmem:[%s0 + $0x1b2] sm:$0xff]
  %v1353 = vld [vmem:[%s0 + $0x1ba] sm:$0xff]
  %v1354 = vld [vmem:[%s0 + $0x1ca] sm:$0xff]
  %v1355 = vld [vmem:[%s0 + $0x1d2] sm:$0xff]
  %v1356 = vld [vmem:[%s0 + $0x1e2] sm:$0xff]
  %v1357 = vld [vmem:[%s0 + $0x1ea] sm:$0xff]
  %v1358 = vld [vmem:[%s0 + $0x1fa] sm:$0xff]
  %v1359 = vld [vmem:[%s0 + $0x202] sm:$0xff]
  %v1360 = vld [vmem:[%s0 + $0x212] sm:$0xff]
  %v1361 = vld [vmem:[%s0 + $0x21a] sm:$0xff]
  %v1362 = vld [vmem:[%s0 + $0x22a] sm:$0xff]
  %v1363 = vld [vmem:[%s0 + $0x232] sm:$0xff]
  %v1364 = vld [vmem:[%s0 + $0x242] sm:$0xff]
  %v1365 = vld [vmem:[%s0 + $0x24a] sm:$0xff]
  %v1366 = vld [vmem:[%s0 + $0x25a] sm:$0xff]
  %v1367 = vld [vmem:[%s0 + $0x262] sm:$0xff]
  %v1368 = vld [vmem:[%s0 + $0x272] sm:$0xff]
  %v1369 = vld [vmem:[%s0 + $0x27a] sm:$0xff]
  %v1370 = vld [vmem:[%s0 + $0x28a] sm:$0xff]
  %v1371 = vld [vmem:[%s0 + $0x292] sm:$0xff]
  %v1372 = vld [vmem:[%s0 + $0x2a2] sm:$0xff]
  %v1373 = vld [vmem:[%s0 + $0x2aa] sm:$0xff]
  %v1374 = vld [vmem:[%s0 + $0x2ba] sm:$0xff]
  %v1375 = vld [vmem:[%s0 + $0x2c2] sm:$0xff]
  %v1376 = vld [vmem:[%s0 + $0x2d2] sm:$0xff]
  %v1377 = vld [vmem:[%s0 + $0x2da] sm:$0xff]
  %v1378 = vld [vmem:[%s0 + $0x2ea] sm:$0xff]
  %v1379 = vld [vmem:[%s0 + $0x2f2] sm:$0xff]
  %v1380 = vld [vmem:[%s0 + $0x302] sm:$0xff]
  %v1381 = vld [vmem:[%s0 + $0x30a] sm:$0xff]
  %v1382 = vld [vmem:[%s0 + $0x31a] sm:$0xff]
  %v1383 = vld [vmem:[%s0 + $0x322] sm:$0xff]
  %s1384 = scalar_lea.vmem %s1, 8
  %v1385 = vld [vmem:[%s1384] sm:$0xf]
  %v1387 = vsel %vm158, %v1320, 0
  %v1390 = vsel %vm158, %v1321, 0
  %v1393 = vsel %vm158, %v1322, 0
  %v1396 = vsel %vm158, %v1323, 0
  %v1399 = vsel %vm158, %v1324, 0
  %v1402 = vsel %vm158, %v1325, 0
  %v1405 = vsel %vm158, %v1326, 0
  %v1408 = vsel %vm158, %v1327, 0
  %v1411 = vsel %vm158, %v1328, 0
  %v1414 = vsel %vm158, %v1329, 0
  %v1417 = vsel %vm158, %v1330, 0
  %v1420 = vsel %vm158, %v1331, 0
  %v1423 = vsel %vm158, %v1332, 0
  %v1426 = vsel %vm158, %v1333, 0
  %v1429 = vsel %vm158, %v1334, 0
  %v1432 = vsel %vm158, %v1335, 0
  %v1435 = vsel %vm158, %v1336, 0
  %v1438 = vsel %vm158, %v1337, 0
  %v1441 = vsel %vm158, %v1338, 0
  %v1444 = vsel %vm158, %v1339, 0
  %v1447 = vsel %vm158, %v1340, 0
  %v1450 = vsel %vm158, %v1341, 0
  %v1453 = vsel %vm158, %v1342, 0
  %v1456 = vsel %vm158, %v1343, 0
  %v1459 = vsel %vm158, %v1344, 0
  %v1462 = vsel %vm158, %v1345, 0
  %v1465 = vsel %vm158, %v1346, 0
  %v1468 = vsel %vm158, %v1347, 0
  %v1471 = vsel %vm158, %v1348, 0
  %v1474 = vsel %vm158, %v1349, 0
  %v1477 = vsel %vm158, %v1350, 0
  %v1480 = vsel %vm158, %v1351, 0
  %v1483 = vsel %vm158, %v1352, 0
  %v1486 = vsel %vm158, %v1353, 0
  %v1489 = vsel %vm158, %v1354, 0
  %v1492 = vsel %vm158, %v1355, 0
  %v1495 = vsel %vm158, %v1356, 0
  %v1498 = vsel %vm158, %v1357, 0
  %v1501 = vsel %vm158, %v1358, 0
  %v1504 = vsel %vm158, %v1359, 0
  %v1507 = vsel %vm158, %v1360, 0
  %v1510 = vsel %vm158, %v1361, 0
  %v1513 = vsel %vm158, %v1362, 0
  %v1516 = vsel %vm158, %v1363, 0
  %v1519 = vsel %vm158, %v1364, 0
  %v1522 = vsel %vm158, %v1365, 0
  %v1525 = vsel %vm158, %v1366, 0
  %v1528 = vsel %vm158, %v1367, 0
  %v1531 = vsel %vm158, %v1368, 0
  %v1534 = vsel %vm158, %v1369, 0
  %v1537 = vsel %vm158, %v1370, 0
  %v1540 = vsel %vm158, %v1371, 0
  %v1543 = vsel %vm158, %v1372, 0
  %v1546 = vsel %vm158, %v1373, 0
  %v1549 = vsel %vm158, %v1374, 0
  %v1552 = vsel %vm158, %v1375, 0
  %v1555 = vsel %vm158, %v1376, 0
  %v1558 = vsel %vm158, %v1377, 0
  %v1561 = vsel %vm158, %v1378, 0
  %v1564 = vsel %vm158, %v1379, 0
  %v1567 = vsel %vm158, %v1380, 0
  %v1570 = vsel %vm158, %v1381, 0
  %v1573 = vsel %vm158, %v1382, 0
  %v1576 = vsel %vm158, %v1383, 0
  %v1579 = vsel %vm351, %v1385, 0
  %1581 = vmatprep.subr.mxu0 0.0
  %1582 = vmatpush1.msra.mxu0 0.0
  %1583 = vmatprep.subr.mxu0 0.0
  %1584 = vmatpush1.msra.mxu0 0.0
  %1585 = vmatprep.subr.mxu0 0.0
  %1586 = vmatpush1.msra.mxu0 0.0
  %1587 = vmatprep.subr.mxu0 0.0
  %1588 = vmatpush1.msra.mxu0 0.0
  %1589 = vmatprep.subr.mxu0 0.0
  %1590 = vmatpush1.msra.mxu0 0.0
  %1591 = vmatprep.subr.mxu0 0.0
  %1592 = vmatpush1.msra.mxu0 0.0
  %1593 = vmatprep.subr.mxu0 0.0
  %1594 = vmatpush1.msra.mxu0 0.0
  %1595 = vmatprep.subr.mxu0 0.0
  %1596 = vmatpush1.msra.mxu0 0.0
  %1597 = vmatprep.subr.mxu0 0.0
  %1598 = vmatpush1.msra.mxu0 0.0
  %1599 = vmatprep.subr.mxu0 0.0
  %1600 = vmatpush1.msra.mxu0 0.0
  %1601 = vmatprep.subr.mxu0 0.0
  %1602 = vmatpush1.msra.mxu0 0.0
  %1603 = vmatprep.subr.mxu0 0.0
  %1604 = vmatpush1.msra.mxu0 0.0
  %1605 = vmatprep.subr.mxu0 0.0
  %1606 = vmatpush1.msra.mxu0 0.0
  %1607 = vmatprep.subr.mxu0 0.0
  %1608 = vmatpush1.msra.mxu0 0.0
  %1609 = vmatprep.subr.mxu0 0.0
  %1610 = vmatpush1.msra.mxu0 0.0
  %1611 = vmatprep.subr.mxu0 0.0
  %1612 = vmatpush1.msra.mxu0 %v1579
  %1613 = vmatprep.subr.mxu0 0.0
  %1614 = vmatpush2.msra.mxu0 0.0
  %1615 = vmatprep.subr.mxu0 0.0
  %1616 = vmatpush2.msra.mxu0 0.0
  %1617 = vmatprep.subr.mxu0 0.0
  %1618 = vmatpush2.msra.mxu0 0.0
  %1619 = vmatprep.subr.mxu0 0.0
  %1620 = vmatpush2.msra.mxu0 0.0
  %1621 = vmatprep.subr.mxu0 0.0
  %1622 = vmatpush2.msra.mxu0 0.0
  %1623 = vmatprep.subr.mxu0 0.0
  %1624 = vmatpush2.msra.mxu0 0.0
  %1625 = vmatprep.subr.mxu0 0.0
  %1626 = vmatpush2.msra.mxu0 0.0
  %1627 = vmatprep.subr.mxu0 0.0
  %1628 = vmatpush2.msra.mxu0 0.0
  %1629 = vmatprep.subr.mxu0 0.0
  %1630 = vmatpush2.msra.mxu0 0.0
  %1631 = vmatprep.subr.mxu0 0.0
  %1632 = vmatpush2.msra.mxu0 0.0
  %1633 = vmatprep.subr.mxu0 0.0
  %1634 = vmatpush2.msra.mxu0 0.0
  %1635 = vmatprep.subr.mxu0 0.0
  %1636 = vmatpush2.msra.mxu0 0.0
  %1637 = vmatprep.subr.mxu0 0.0
  %1638 = vmatpush2.msra.mxu0 0.0
  %1639 = vmatprep.subr.mxu0 0.0
  %1640 = vmatpush2.msra.mxu0 0.0
  %1641 = vmatprep.subr.mxu0 0.0
  %1642 = vmatpush2.msra.mxu0 0.0
  %1643 = vmatprep.subr.mxu0 0.0
  %1644 = vmatpush2.msra.mxu0 0.0
  %1645 = vmatprep.mubr.f32.mxu0 0.0
  %1646 = vmatmul.mubr.f32.gmra.mxu0 %v1387
  %v1647 = vpop.f32.mrf.mxu0
  %v1648 = vadd.f32 0.0, %v1647
  %v1649 = vpop.f32.mrf.mxu0
  %1650 = vmatprep.mubr.f32.mxu0 0.0
  %1651 = vmatmul.mubr.f32.gmra.mxu0 %v1390
  %v1652 = vpop.f32.mrf.mxu0
  %v1653 = vadd.f32 0.0, %v1652
  %v1654 = vpop.f32.mrf.mxu0
  %1655 = vmatprep.mubr.f32.mxu0 0.0
  %1656 = vmatmul.mubr.f32.gmra.mxu0 %v1393
  %v1657 = vpop.f32.mrf.mxu0
  %v1658 = vadd.f32 0.0, %v1657
  %v1659 = vpop.f32.mrf.mxu0
  %1660 = vmatprep.mubr.f32.mxu0 0.0
  %1661 = vmatmul.mubr.f32.gmra.mxu0 %v1396
  %v1662 = vpop.f32.mrf.mxu0
  %v1663 = vadd.f32 0.0, %v1662
  %v1664 = vpop.f32.mrf.mxu0
  %1665 = vmatprep.mubr.f32.mxu0 0.0
  %1666 = vmatmul.mubr.f32.gmra.mxu0 %v1399
  %v1667 = vpop.f32.mrf.mxu0
  %v1668 = vadd.f32 0.0, %v1667
  %v1669 = vpop.f32.mrf.mxu0
  %1670 = vmatprep.mubr.f32.mxu0 0.0
  %1671 = vmatmul.mubr.f32.gmra.mxu0 %v1402
  %v1672 = vpop.f32.mrf.mxu0
  %v1673 = vadd.f32 0.0, %v1672
  %v1674 = vpop.f32.mrf.mxu0
  %1675 = vmatprep.mubr.f32.mxu0 0.0
  %1676 = vmatmul.mubr.f32.gmra.mxu0 %v1405
  %v1677 = vpop.f32.mrf.mxu0
  %v1678 = vadd.f32 0.0, %v1677
  %v1679 = vpop.f32.mrf.mxu0
  %1680 = vmatprep.mubr.f32.mxu0 0.0
  %1681 = vmatmul.mubr.f32.gmra.mxu0 %v1408
  %v1682 = vpop.f32.mrf.mxu0
  %v1683 = vadd.f32 0.0, %v1682
  %v1684 = vpop.f32.mrf.mxu0
  %1685 = vmatprep.mubr.f32.mxu0 0.0
  %1686 = vmatmul.mubr.f32.gmra.mxu0 %v1411
  %v1687 = vpop.f32.mrf.mxu0
  %v1688 = vadd.f32 0.0, %v1687
  %v1689 = vpop.f32.mrf.mxu0
  %1690 = vmatprep.mubr.f32.mxu0 0.0
  %1691 = vmatmul.mubr.f32.gmra.mxu0 %v1414
  %v1692 = vpop.f32.mrf.mxu0
  %v1693 = vadd.f32 0.0, %v1692
  %v1694 = vpop.f32.mrf.mxu0
  %1695 = vmatprep.mubr.f32.mxu0 0.0
  %1696 = vmatmul.mubr.f32.gmra.mxu0 %v1417
  %v1697 = vpop.f32.mrf.mxu0
  %v1698 = vadd.f32 0.0, %v1697
  %v1699 = vpop.f32.mrf.mxu0
  %1700 = vmatprep.mubr.f32.mxu0 0.0
  %1701 = vmatmul.mubr.f32.gmra.mxu0 %v1420
  %v1702 = vpop.f32.mrf.mxu0
  %v1703 = vadd.f32 0.0, %v1702
  %v1704 = vpop.f32.mrf.mxu0
  %1705 = vmatprep.mubr.f32.mxu0 0.0
  %1706 = vmatmul.mubr.f32.gmra.mxu0 %v1423
  %v1707 = vpop.f32.mrf.mxu0
  %v1708 = vadd.f32 0.0, %v1707
  %v1709 = vpop.f32.mrf.mxu0
  %1710 = vmatprep.mubr.f32.mxu0 0.0
  %1711 = vmatmul.mubr.f32.gmra.mxu0 %v1426
  %v1712 = vpop.f32.mrf.mxu0
  %v1713 = vadd.f32 0.0, %v1712
  %v1714 = vpop.f32.mrf.mxu0
  %1715 = vmatprep.mubr.f32.mxu0 0.0
  %1716 = vmatmul.mubr.f32.gmra.mxu0 %v1429
  %v1717 = vpop.f32.mrf.mxu0
  %v1718 = vadd.f32 0.0, %v1717
  %v1719 = vpop.f32.mrf.mxu0
  %1720 = vmatprep.mubr.f32.mxu0 0.0
  %1721 = vmatmul.mubr.f32.gmra.mxu0 %v1432
  %v1722 = vpop.f32.mrf.mxu0
  %v1723 = vadd.f32 0.0, %v1722
  %v1724 = vpop.f32.mrf.mxu0
  %1725 = vmatprep.mubr.f32.mxu0 0.0
  %1726 = vmatmul.mubr.f32.gmra.mxu0 %v1435
  %v1727 = vpop.f32.mrf.mxu0
  %v1728 = vadd.f32 0.0, %v1727
  %v1729 = vpop.f32.mrf.mxu0
  %1730 = vmatprep.mubr.f32.mxu0 0.0
  %1731 = vmatmul.mubr.f32.gmra.mxu0 %v1438
  %v1732 = vpop.f32.mrf.mxu0
  %v1733 = vadd.f32 0.0, %v1732
  %v1734 = vpop.f32.mrf.mxu0
  %1735 = vmatprep.mubr.f32.mxu0 0.0
  %1736 = vmatmul.mubr.f32.gmra.mxu0 %v1441
  %v1737 = vpop.f32.mrf.mxu0
  %v1738 = vadd.f32 0.0, %v1737
  %v1739 = vpop.f32.mrf.mxu0
  %1740 = vmatprep.mubr.f32.mxu0 0.0
  %1741 = vmatmul.mubr.f32.gmra.mxu0 %v1444
  %v1742 = vpop.f32.mrf.mxu0
  %v1743 = vadd.f32 0.0, %v1742
  %v1744 = vpop.f32.mrf.mxu0
  %1745 = vmatprep.mubr.f32.mxu0 0.0
  %1746 = vmatmul.mubr.f32.gmra.mxu0 %v1447
  %v1747 = vpop.f32.mrf.mxu0
  %v1748 = vadd.f32 0.0, %v1747
  %v1749 = vpop.f32.mrf.mxu0
  %1750 = vmatprep.mubr.f32.mxu0 0.0
  %1751 = vmatmul.mubr.f32.gmra.mxu0 %v1450
  %v1752 = vpop.f32.mrf.mxu0
  %v1753 = vadd.f32 0.0, %v1752
  %v1754 = vpop.f32.mrf.mxu0
  %1755 = vmatprep.mubr.f32.mxu0 0.0
  %1756 = vmatmul.mubr.f32.gmra.mxu0 %v1453
  %v1757 = vpop.f32.mrf.mxu0
  %v1758 = vadd.f32 0.0, %v1757
  %v1759 = vpop.f32.mrf.mxu0
  %1760 = vmatprep.mubr.f32.mxu0 0.0
  %1761 = vmatmul.mubr.f32.gmra.mxu0 %v1456
  %v1762 = vpop.f32.mrf.mxu0
  %v1763 = vadd.f32 0.0, %v1762
  %v1764 = vpop.f32.mrf.mxu0
  %1765 = vmatprep.mubr.f32.mxu0 0.0
  %1766 = vmatmul.mubr.f32.gmra.mxu0 %v1459
  %v1767 = vpop.f32.mrf.mxu0
  %v1768 = vadd.f32 0.0, %v1767
  %v1769 = vpop.f32.mrf.mxu0
  %1770 = vmatprep.mubr.f32.mxu0 0.0
  %1771 = vmatmul.mubr.f32.gmra.mxu0 %v1462
  %v1772 = vpop.f32.mrf.mxu0
  %v1773 = vadd.f32 0.0, %v1772
  %v1774 = vpop.f32.mrf.mxu0
  %1775 = vmatprep.mubr.f32.mxu0 0.0
  %1776 = vmatmul.mubr.f32.gmra.mxu0 %v1465
  %v1777 = vpop.f32.mrf.mxu0
  %v1778 = vadd.f32 0.0, %v1777
  %v1779 = vpop.f32.mrf.mxu0
  %1780 = vmatprep.mubr.f32.mxu0 0.0
  %1781 = vmatmul.mubr.f32.gmra.mxu0 %v1468
  %v1782 = vpop.f32.mrf.mxu0
  %v1783 = vadd.f32 0.0, %v1782
  %v1784 = vpop.f32.mrf.mxu0
  %1785 = vmatprep.mubr.f32.mxu0 0.0
  %1786 = vmatmul.mubr.f32.gmra.mxu0 %v1471
  %v1787 = vpop.f32.mrf.mxu0
  %v1788 = vadd.f32 0.0, %v1787
  %v1789 = vpop.f32.mrf.mxu0
  %1790 = vmatprep.mubr.f32.mxu0 0.0
  %1791 = vmatmul.mubr.f32.gmra.mxu0 %v1474
  %v1792 = vpop.f32.mrf.mxu0
  %v1793 = vadd.f32 0.0, %v1792
  %v1794 = vpop.f32.mrf.mxu0
  %1795 = vmatprep.mubr.f32.mxu0 0.0
  %1796 = vmatmul.mubr.f32.gmra.mxu0 %v1477
  %v1797 = vpop.f32.mrf.mxu0
  %v1798 = vadd.f32 0.0, %v1797
  %v1799 = vpop.f32.mrf.mxu0
  %1800 = vmatprep.mubr.f32.mxu0 0.0
  %1801 = vmatmul.mubr.f32.gmra.mxu0 %v1480
  %v1802 = vpop.f32.mrf.mxu0
  %v1803 = vadd.f32 0.0, %v1802
  %v1804 = vpop.f32.mrf.mxu0
  %1805 = vmatprep.mubr.f32.mxu0 0.0
  %1806 = vmatmul.mubr.f32.gmra.mxu0 %v1483
  %v1807 = vpop.f32.mrf.mxu0
  %v1808 = vadd.f32 0.0, %v1807
  %v1809 = vpop.f32.mrf.mxu0
  %1810 = vmatprep.mubr.f32.mxu0 0.0
  %1811 = vmatmul.mubr.f32.gmra.mxu0 %v1486
  %v1812 = vpop.f32.mrf.mxu0
  %v1813 = vadd.f32 0.0, %v1812
  %v1814 = vpop.f32.mrf.mxu0
  %1815 = vmatprep.mubr.f32.mxu0 0.0
  %1816 = vmatmul.mubr.f32.gmra.mxu0 %v1489
  %v1817 = vpop.f32.mrf.mxu0
  %v1818 = vadd.f32 0.0, %v1817
  %v1819 = vpop.f32.mrf.mxu0
  %1820 = vmatprep.mubr.f32.mxu0 0.0
  %1821 = vmatmul.mubr.f32.gmra.mxu0 %v1492
  %v1822 = vpop.f32.mrf.mxu0
  %v1823 = vadd.f32 0.0, %v1822
  %v1824 = vpop.f32.mrf.mxu0
  %1825 = vmatprep.mubr.f32.mxu0 0.0
  %1826 = vmatmul.mubr.f32.gmra.mxu0 %v1495
  %v1827 = vpop.f32.mrf.mxu0
  %v1828 = vadd.f32 0.0, %v1827
  %v1829 = vpop.f32.mrf.mxu0
  %1830 = vmatprep.mubr.f32.mxu0 0.0
  %1831 = vmatmul.mubr.f32.gmra.mxu0 %v1498
  %v1832 = vpop.f32.mrf.mxu0
  %v1833 = vadd.f32 0.0, %v1832
  %v1834 = vpop.f32.mrf.mxu0
  %1835 = vmatprep.mubr.f32.mxu0 0.0
  %1836 = vmatmul.mubr.f32.gmra.mxu0 %v1501
  %v1837 = vpop.f32.mrf.mxu0
  %v1838 = vadd.f32 0.0, %v1837
  %v1839 = vpop.f32.mrf.mxu0
  %1840 = vmatprep.mubr.f32.mxu0 0.0
  %1841 = vmatmul.mubr.f32.gmra.mxu0 %v1504
  %v1842 = vpop.f32.mrf.mxu0
  %v1843 = vadd.f32 0.0, %v1842
  %v1844 = vpop.f32.mrf.mxu0
  %1845 = vmatprep.mubr.f32.mxu0 0.0
  %1846 = vmatmul.mubr.f32.gmra.mxu0 %v1507
  %v1847 = vpop.f32.mrf.mxu0
  %v1848 = vadd.f32 0.0, %v1847
  %v1849 = vpop.f32.mrf.mxu0
  %1850 = vmatprep.mubr.f32.mxu0 0.0
  %1851 = vmatmul.mubr.f32.gmra.mxu0 %v1510
  %v1852 = vpop.f32.mrf.mxu0
  %v1853 = vadd.f32 0.0, %v1852
  %v1854 = vpop.f32.mrf.mxu0
  %1855 = vmatprep.mubr.f32.mxu0 0.0
  %1856 = vmatmul.mubr.f32.gmra.mxu0 %v1513
  %v1857 = vpop.f32.mrf.mxu0
  %v1858 = vadd.f32 0.0, %v1857
  %v1859 = vpop.f32.mrf.mxu0
  %1860 = vmatprep.mubr.f32.mxu0 0.0
  %1861 = vmatmul.mubr.f32.gmra.mxu0 %v1516
  %v1862 = vpop.f32.mrf.mxu0
  %v1863 = vadd.f32 0.0, %v1862
  %v1864 = vpop.f32.mrf.mxu0
  %1865 = vmatprep.mubr.f32.mxu0 0.0
  %1866 = vmatmul.mubr.f32.gmra.mxu0 %v1519
  %v1867 = vpop.f32.mrf.mxu0
  %v1868 = vadd.f32 0.0, %v1867
  %v1869 = vpop.f32.mrf.mxu0
  %1870 = vmatprep.mubr.f32.mxu0 0.0
  %1871 = vmatmul.mubr.f32.gmra.mxu0 %v1522
  %v1872 = vpop.f32.mrf.mxu0
  %v1873 = vadd.f32 0.0, %v1872
  %v1874 = vpop.f32.mrf.mxu0
  %1875 = vmatprep.mubr.f32.mxu0 0.0
  %1876 = vmatmul.mubr.f32.gmra.mxu0 %v1525
  %v1877 = vpop.f32.mrf.mxu0
  %v1878 = vadd.f32 0.0, %v1877
  %v1879 = vpop.f32.mrf.mxu0
  %1880 = vmatprep.mubr.f32.mxu0 0.0
  %1881 = vmatmul.mubr.f32.gmra.mxu0 %v1528
  %v1882 = vpop.f32.mrf.mxu0
  %v1883 = vadd.f32 0.0, %v1882
  %v1884 = vpop.f32.mrf.mxu0
  %1885 = vmatprep.mubr.f32.mxu0 0.0
  %1886 = vmatmul.mubr.f32.gmra.mxu0 %v1531
  %v1887 = vpop.f32.mrf.mxu0
  %v1888 = vadd.f32 0.0, %v1887
  %v1889 = vpop.f32.mrf.mxu0
  %1890 = vmatprep.mubr.f32.mxu0 0.0
  %1891 = vmatmul.mubr.f32.gmra.mxu0 %v1534
  %v1892 = vpop.f32.mrf.mxu0
  %v1893 = vadd.f32 0.0, %v1892
  %v1894 = vpop.f32.mrf.mxu0
  %1895 = vmatprep.mubr.f32.mxu0 0.0
  %1896 = vmatmul.mubr.f32.gmra.mxu0 %v1537
  %v1897 = vpop.f32.mrf.mxu0
  %v1898 = vadd.f32 0.0, %v1897
  %v1899 = vpop.f32.mrf.mxu0
  %1900 = vmatprep.mubr.f32.mxu0 0.0
  %1901 = vmatmul.mubr.f32.gmra.mxu0 %v1540
  %v1902 = vpop.f32.mrf.mxu0
  %v1903 = vadd.f32 0.0, %v1902
  %v1904 = vpop.f32.mrf.mxu0
  %1905 = vmatprep.mubr.f32.mxu0 0.0
  %1906 = vmatmul.mubr.f32.gmra.mxu0 %v1543
  %v1907 = vpop.f32.mrf.mxu0
  %v1908 = vadd.f32 0.0, %v1907
  %v1909 = vpop.f32.mrf.mxu0
  %1910 = vmatprep.mubr.f32.mxu0 0.0
  %1911 = vmatmul.mubr.f32.gmra.mxu0 %v1546
  %v1912 = vpop.f32.mrf.mxu0
  %v1913 = vadd.f32 0.0, %v1912
  %v1914 = vpop.f32.mrf.mxu0
  %1915 = vmatprep.mubr.f32.mxu0 0.0
  %1916 = vmatmul.mubr.f32.gmra.mxu0 %v1549
  %v1917 = vpop.f32.mrf.mxu0
  %v1918 = vadd.f32 0.0, %v1917
  %v1919 = vpop.f32.mrf.mxu0
  %1920 = vmatprep.mubr.f32.mxu0 0.0
  %1921 = vmatmul.mubr.f32.gmra.mxu0 %v1552
  %v1922 = vpop.f32.mrf.mxu0
  %v1923 = vadd.f32 0.0, %v1922
  %v1924 = vpop.f32.mrf.mxu0
  %1925 = vmatprep.mubr.f32.mxu0 0.0
  %1926 = vmatmul.mubr.f32.gmra.mxu0 %v1555
  %v1927 = vpop.f32.mrf.mxu0
  %v1928 = vadd.f32 0.0, %v1927
  %v1929 = vpop.f32.mrf.mxu0
  %1930 = vmatprep.mubr.f32.mxu0 0.0
  %1931 = vmatmul.mubr.f32.gmra.mxu0 %v1558
  %v1932 = vpop.f32.mrf.mxu0
  %v1933 = vadd.f32 0.0, %v1932
  %v1934 = vpop.f32.mrf.mxu0
  %1935 = vmatprep.mubr.f32.mxu0 0.0
  %1936 = vmatmul.mubr.f32.gmra.mxu0 %v1561
  %v1937 = vpop.f32.mrf.mxu0
  %v1938 = vadd.f32 0.0, %v1937
  %v1939 = vpop.f32.mrf.mxu0
  %1940 = vmatprep.mubr.f32.mxu0 0.0
  %1941 = vmatmul.mubr.f32.gmra.mxu0 %v1564
  %v1942 = vpop.f32.mrf.mxu0
  %v1943 = vadd.f32 0.0, %v1942
  %v1944 = vpop.f32.mrf.mxu0
  %1945 = vmatprep.mubr.f32.mxu0 0.0
  %1946 = vmatmul.mubr.f32.gmra.mxu0 %v1567
  %v1947 = vpop.f32.mrf.mxu0
  %v1948 = vadd.f32 0.0, %v1947
  %v1949 = vpop.f32.mrf.mxu0
  %1950 = vmatprep.mubr.f32.mxu0 0.0
  %1951 = vmatmul.mubr.f32.gmra.mxu0 %v1570
  %v1952 = vpop.f32.mrf.mxu0
  %v1953 = vadd.f32 0.0, %v1952
  %v1954 = vpop.f32.mrf.mxu0
  %1955 = vmatprep.mubr.f32.mxu0 0.0
  %1956 = vmatmul.mubr.f32.gmra.mxu0 %v1573
  %v1957 = vpop.f32.mrf.mxu0
  %v1958 = vadd.f32 0.0, %v1957
  %v1959 = vpop.f32.mrf.mxu0
  %1960 = vmatprep.mubr.f32.mxu0 0.0
  %1961 = vmatmul.mubr.f32.gmra.mxu0 %v1576
  %v1962 = vpop.f32.mrf.mxu0
  %v1963 = vadd.f32 0.0, %v1962
  %v1964 = vpop.f32.mrf.mxu0
  %1965 = vdwg.mxu0
  %v1966 = vadd.f32 %v1002, %v1648
  %v1967 = vadd.f32 %v1007, %v1653
  %v1968 = vadd.f32 %v1012, %v1658
  %v1969 = vadd.f32 %v1017, %v1663
  %v1970 = vadd.f32 %v1022, %v1668
  %v1971 = vadd.f32 %v1027, %v1673
  %v1972 = vadd.f32 %v1032, %v1678
  %v1973 = vadd.f32 %v1037, %v1683
  %v1974 = vadd.f32 %v1042, %v1688
  %v1975 = vadd.f32 %v1047, %v1693
  %v1976 = vadd.f32 %v1052, %v1698
  %v1977 = vadd.f32 %v1057, %v1703
  %v1978 = vadd.f32 %v1062, %v1708
  %v1979 = vadd.f32 %v1067, %v1713
  %v1980 = vadd.f32 %v1072, %v1718
  %v1981 = vadd.f32 %v1077, %v1723
  %v1982 = vadd.f32 %v1082, %v1728
  %v1983 = vadd.f32 %v1087, %v1733
  %v1984 = vadd.f32 %v1092, %v1738
  %v1985 = vadd.f32 %v1097, %v1743
  %v1986 = vadd.f32 %v1102, %v1748
  %v1987 = vadd.f32 %v1107, %v1753
  %v1988 = vadd.f32 %v1112, %v1758
  %v1989 = vadd.f32 %v1117, %v1763
  %v1990 = vadd.f32 %v1122, %v1768
  %v1991 = vadd.f32 %v1127, %v1773
  %v1992 = vadd.f32 %v1132, %v1778
  %v1993 = vadd.f32 %v1137, %v1783
  %v1994 = vadd.f32 %v1142, %v1788
  %v1995 = vadd.f32 %v1147, %v1793
  %v1996 = vadd.f32 %v1152, %v1798
  %v1997 = vadd.f32 %v1157, %v1803
  %v1998 = vadd.f32 %v1162, %v1808
  %v1999 = vadd.f32 %v1167, %v1813
  %v2000 = vadd.f32 %v1172, %v1818
  %v2001 = vadd.f32 %v1177, %v1823
  %v2002 = vadd.f32 %v1182, %v1828
  %v2003 = vadd.f32 %v1187, %v1833
  %v2004 = vadd.f32 %v1192, %v1838
  %v2005 = vadd.f32 %v1197, %v1843
  %v2006 = vadd.f32 %v1202, %v1848
  %v2007 = vadd.f32 %v1207, %v1853
  %v2008 = vadd.f32 %v1212, %v1858
  %v2009 = vadd.f32 %v1217, %v1863
  %v2010 = vadd.f32 %v1222, %v1868
  %v2011 = vadd.f32 %v1227, %v1873
  %v2012 = vadd.f32 %v1232, %v1878
  %v2013 = vadd.f32 %v1237, %v1883
  %v2014 = vadd.f32 %v1242, %v1888
  %v2015 = vadd.f32 %v1247, %v1893
  %v2016 = vadd.f32 %v1252, %v1898
  %v2017 = vadd.f32 %v1257, %v1903
  %v2018 = vadd.f32 %v1262, %v1908
  %v2019 = vadd.f32 %v1267, %v1913
  %v2020 = vadd.f32 %v1272, %v1918
  %v2021 = vadd.f32 %v1277, %v1923
  %v2022 = vadd.f32 %v1282, %v1928
  %v2023 = vadd.f32 %v1287, %v1933
  %v2024 = vadd.f32 %v1292, %v1938
  %v2025 = vadd.f32 %v1297, %v1943
  %v2026 = vadd.f32 %v1302, %v1948
  %v2027 = vadd.f32 %v1307, %v1953
  %v2028 = vadd.f32 %v1312, %v1958
  %v2029 = vadd.f32 %v1317, %v1963
  %s2030 = scalar_lea.vmem %s0, 24
  %v2031 = vld [vmem:[%s2030] sm:$0xff]
  %v2032 = vld [vmem:[%s2030 + $0x8] sm:$0xff]
  %v2033 = vld [vmem:[%s2030 + $0x18] sm:$0xff]
  %v2034 = vld [vmem:[%s2030 + $0x20] sm:$0xff]
  %v2035 = vld [vmem:[%s2030 + $0x30] sm:$0xff]
  %v2036 = vld [vmem:[%s2030 + $0x38] sm:$0xff]
  %v2037 = vld [vmem:[%s2030 + $0x48] sm:$0xff]
  %v2038 = vld [vmem:[%s2030 + $0x50] sm:$0xff]
  %v2039 = vld [vmem:[%s2030 + $0x60] sm:$0xff]
  %v2040 = vld [vmem:[%s2030 + $0x68] sm:$0xff]
  %v2041 = vld [vmem:[%s2030 + $0x78] sm:$0xff]
  %v2042 = vld [vmem:[%s2030 + $0x80] sm:$0xff]
  %v2043 = vld [vmem:[%s2030 + $0x90] sm:$0xff]
  %v2044 = vld [vmem:[%s2030 + $0x98] sm:$0xff]
  %v2045 = vld [vmem:[%s2030 + $0xa8] sm:$0xff]
  %v2046 = vld [vmem:[%s2030 + $0xb0] sm:$0xff]
  %v2047 = vld [vmem:[%s2030 + $0xc0] sm:$0xff]
  %v2048 = vld [vmem:[%s2030 + $0xc8] sm:$0xff]
  %v2049 = vld [vmem:[%s2030 + $0xd8] sm:$0xff]
  %v2050 = vld [vmem:[%s2030 + $0xe0] sm:$0xff]
  %v2051 = vld [vmem:[%s2030 + $0xf0] sm:$0xff]
  %v2052 = vld [vmem:[%s2030 + $0xf8] sm:$0xff]
  %v2053 = vld [vmem:[%s2030 + $0x108] sm:$0xff]
  %v2054 = vld [vmem:[%s2030 + $0x110] sm:$0xff]
  %v2055 = vld [vmem:[%s2030 + $0x120] sm:$0xff]
  %v2056 = vld [vmem:[%s2030 + $0x128] sm:$0xff]
  %v2057 = vld [vmem:[%s2030 + $0x138] sm:$0xff]
  %v2058 = vld [vmem:[%s2030 + $0x140] sm:$0xff]
  %v2059 = vld [vmem:[%s2030 + $0x150] sm:$0xff]
  %v2060 = vld [vmem:[%s2030 + $0x158] sm:$0xff]
  %v2061 = vld [vmem:[%s2030 + $0x168] sm:$0xff]
  %v2062 = vld [vmem:[%s2030 + $0x170] sm:$0xff]
  %v2063 = vld [vmem:[%s2030 + $0x1b0] sm:$0xff]
  %v2064 = vld [vmem:[%s2030 + $0x1b8] sm:$0xff]
  %v2065 = vld [vmem:[%s2030 + $0x1c8] sm:$0xff]
  %v2066 = vld [vmem:[%s2030 + $0x1d0] sm:$0xff]
  %v2067 = vld [vmem:[%s2030 + $0x1e0] sm:$0xff]
  %v2068 = vld [vmem:[%s2030 + $0x1e8] sm:$0xff]
  %v2069 = vld [vmem:[%s2030 + $0x1f8] sm:$0xff]
  %v2070 = vld [vmem:[%s2030 + $0x200] sm:$0xff]
  %v2071 = vld [vmem:[%s2030 + $0x210] sm:$0xff]
  %v2072 = vld [vmem:[%s2030 + $0x218] sm:$0xff]
  %v2073 = vld [vmem:[%s2030 + $0x228] sm:$0xff]
  %v2074 = vld [vmem:[%s2030 + $0x230] sm:$0xff]
  %v2075 = vld [vmem:[%s2030 + $0x240] sm:$0xff]
  %v2076 = vld [vmem:[%s2030 + $0x248] sm:$0xff]
  %v2077 = vld [vmem:[%s2030 + $0x258] sm:$0xff]
  %v2078 = vld [vmem:[%s2030 + $0x260] sm:$0xff]
  %v2079 = vld [vmem:[%s2030 + $0x270] sm:$0xff]
  %v2080 = vld [vmem:[%s2030 + $0x278] sm:$0xff]
  %v2081 = vld [vmem:[%s2030 + $0x288] sm:$0xff]
  %v2082 = vld [vmem:[%s2030 + $0x290] sm:$0xff]
  %v2083 = vld [vmem:[%s2030 + $0x2a0] sm:$0xff]
  %v2084 = vld [vmem:[%s2030 + $0x2a8] sm:$0xff]
  %v2085 = vld [vmem:[%s2030 + $0x2b8] sm:$0xff]
  %v2086 = vld [vmem:[%s2030 + $0x2c0] sm:$0xff]
  %v2087 = vld [vmem:[%s2030 + $0x2d0] sm:$0xff]
  %v2088 = vld [vmem:[%s2030 + $0x2d8] sm:$0xff]
  %v2089 = vld [vmem:[%s2030 + $0x2e8] sm:$0xff]
  %v2090 = vld [vmem:[%s2030 + $0x2f0] sm:$0xff]
  %v2091 = vld [vmem:[%s2030 + $0x300] sm:$0xff]
  %v2092 = vld [vmem:[%s2030 + $0x308] sm:$0xff]
  %v2093 = vld [vmem:[%s2030 + $0x318] sm:$0xff]
  %v2094 = vld [vmem:[%s2030 + $0x320] sm:$0xff]
  %s2095 = scalar_lea.vmem %s1, 12
  %v2096 = vld [vmem:[%s2095] sm:$0xf]
  %v2098 = vsel %vm158, %v2031, 0
  %v2101 = vsel %vm158, %v2032, 0
  %v2104 = vsel %vm158, %v2033, 0
  %v2107 = vsel %vm158, %v2034, 0
  %v2110 = vsel %vm158, %v2035, 0
  %v2113 = vsel %vm158, %v2036, 0
  %v2116 = vsel %vm158, %v2037, 0
  %v2119 = vsel %vm158, %v2038, 0
  %v2122 = vsel %vm158, %v2039, 0
  %v2125 = vsel %vm158, %v2040, 0
  %v2128 = vsel %vm158, %v2041, 0
  %v2131 = vsel %vm158, %v2042, 0
  %v2134 = vsel %vm158, %v2043, 0
  %v2137 = vsel %vm158, %v2044, 0
  %v2140 = vsel %vm158, %v2045, 0
  %v2143 = vsel %vm158, %v2046, 0
  %v2146 = vsel %vm158, %v2047, 0
  %v2149 = vsel %vm158, %v2048, 0
  %v2152 = vsel %vm158, %v2049, 0
  %v2155 = vsel %vm158, %v2050, 0
  %v2158 = vsel %vm158, %v2051, 0
  %v2161 = vsel %vm158, %v2052, 0
  %v2164 = vsel %vm158, %v2053, 0
  %v2167 = vsel %vm158, %v2054, 0
  %v2170 = vsel %vm158, %v2055, 0
  %v2173 = vsel %vm158, %v2056, 0
  %v2176 = vsel %vm158, %v2057, 0
  %v2179 = vsel %vm158, %v2058, 0
  %v2182 = vsel %vm158, %v2059, 0
  %v2185 = vsel %vm158, %v2060, 0
  %v2188 = vsel %vm158, %v2061, 0
  %v2191 = vsel %vm158, %v2062, 0
  %v2194 = vsel %vm158, %v2063, 0
  %v2197 = vsel %vm158, %v2064, 0
  %v2200 = vsel %vm158, %v2065, 0
  %v2203 = vsel %vm158, %v2066, 0
  %v2206 = vsel %vm158, %v2067, 0
  %v2209 = vsel %vm158, %v2068, 0
  %v2212 = vsel %vm158, %v2069, 0
  %v2215 = vsel %vm158, %v2070, 0
  %v2218 = vsel %vm158, %v2071, 0
  %v2221 = vsel %vm158, %v2072, 0
  %v2224 = vsel %vm158, %v2073, 0
  %v2227 = vsel %vm158, %v2074, 0
  %v2230 = vsel %vm158, %v2075, 0
  %v2233 = vsel %vm158, %v2076, 0
  %v2236 = vsel %vm158, %v2077, 0
  %v2239 = vsel %vm158, %v2078, 0
  %v2242 = vsel %vm158, %v2079, 0
  %v2245 = vsel %vm158, %v2080, 0
  %v2248 = vsel %vm158, %v2081, 0
  %v2251 = vsel %vm158, %v2082, 0
  %v2254 = vsel %vm158, %v2083, 0
  %v2257 = vsel %vm158, %v2084, 0
  %v2260 = vsel %vm158, %v2085, 0
  %v2263 = vsel %vm158, %v2086, 0
  %v2266 = vsel %vm158, %v2087, 0
  %v2269 = vsel %vm158, %v2088, 0
  %v2272 = vsel %vm158, %v2089, 0
  %v2275 = vsel %vm158, %v2090, 0
  %v2278 = vsel %vm158, %v2091, 0
  %v2281 = vsel %vm158, %v2092, 0
  %v2284 = vsel %vm158, %v2093, 0
  %v2287 = vsel %vm158, %v2094, 0
  %v2290 = vsel %vm351, %v2096, 0
  %2292 = vmatprep.subr.mxu0 0.0
  %2293 = vmatpush1.msra.mxu0 0.0
  %2294 = vmatprep.subr.mxu0 0.0
  %2295 = vmatpush1.msra.mxu0 0.0
  %2296 = vmatprep.subr.mxu0 0.0
  %2297 = vmatpush1.msra.mxu0 0.0
  %2298 = vmatprep.subr.mxu0 0.0
  %2299 = vmatpush1.msra.mxu0 0.0
  %2300 = vmatprep.subr.mxu0 0.0
  %2301 = vmatpush1.msra.mxu0 0.0
  %2302 = vmatprep.subr.mxu0 0.0
  %2303 = vmatpush1.msra.mxu0 0.0
  %2304 = vmatprep.subr.mxu0 0.0
  %2305 = vmatpush1.msra.mxu0 0.0
  %2306 = vmatprep.subr.mxu0 0.0
  %2307 = vmatpush1.msra.mxu0 0.0
  %2308 = vmatprep.subr.mxu0 0.0
  %2309 = vmatpush1.msra.mxu0 0.0
  %2310 = vmatprep.subr.mxu0 0.0
  %2311 = vmatpush1.msra.mxu0 0.0
  %2312 = vmatprep.subr.mxu0 0.0
  %2313 = vmatpush1.msra.mxu0 0.0
  %2314 = vmatprep.subr.mxu0 0.0
  %2315 = vmatpush1.msra.mxu0 0.0
  %2316 = vmatprep.subr.mxu0 0.0
  %2317 = vmatpush1.msra.mxu0 0.0
  %2318 = vmatprep.subr.mxu0 0.0
  %2319 = vmatpush1.msra.mxu0 0.0
  %2320 = vmatprep.subr.mxu0 0.0
  %2321 = vmatpush1.msra.mxu0 0.0
  %2322 = vmatprep.subr.mxu0 0.0
  %2323 = vmatpush1.msra.mxu0 %v2290
  %2324 = vmatprep.subr.mxu0 0.0
  %2325 = vmatpush2.msra.mxu0 0.0
  %2326 = vmatprep.subr.mxu0 0.0
  %2327 = vmatpush2.msra.mxu0 0.0
  %2328 = vmatprep.subr.mxu0 0.0
  %2329 = vmatpush2.msra.mxu0 0.0
  %2330 = vmatprep.subr.mxu0 0.0
  %2331 = vmatpush2.msra.mxu0 0.0
  %2332 = vmatprep.subr.mxu0 0.0
  %2333 = vmatpush2.msra.mxu0 0.0
  %2334 = vmatprep.subr.mxu0 0.0
  %2335 = vmatpush2.msra.mxu0 0.0
  %2336 = vmatprep.subr.mxu0 0.0
  %2337 = vmatpush2.msra.mxu0 0.0
  %2338 = vmatprep.subr.mxu0 0.0
  %2339 = vmatpush2.msra.mxu0 0.0
  %2340 = vmatprep.subr.mxu0 0.0
  %2341 = vmatpush2.msra.mxu0 0.0
  %2342 = vmatprep.subr.mxu0 0.0
  %2343 = vmatpush2.msra.mxu0 0.0
  %2344 = vmatprep.subr.mxu0 0.0
  %2345 = vmatpush2.msra.mxu0 0.0
  %2346 = vmatprep.subr.mxu0 0.0
  %2347 = vmatpush2.msra.mxu0 0.0
  %2348 = vmatprep.subr.mxu0 0.0
  %2349 = vmatpush2.msra.mxu0 0.0
  %2350 = vmatprep.subr.mxu0 0.0
  %2351 = vmatpush2.msra.mxu0 0.0
  %2352 = vmatprep.subr.mxu0 0.0
  %2353 = vmatpush2.msra.mxu0 0.0
  %2354 = vmatprep.subr.mxu0 0.0
  %2355 = vmatpush2.msra.mxu0 0.0
  %2356 = vmatprep.mubr.f32.mxu0 0.0
  %2357 = vmatmul.mubr.f32.gmra.mxu0 %v2098
  %v2358 = vpop.f32.mrf.mxu0
  %v2359 = vadd.f32 0.0, %v2358
  %v2360 = vpop.f32.mrf.mxu0
  %2361 = vmatprep.mubr.f32.mxu0 0.0
  %2362 = vmatmul.mubr.f32.gmra.mxu0 %v2101
  %v2363 = vpop.f32.mrf.mxu0
  %v2364 = vadd.f32 0.0, %v2363
  %v2365 = vpop.f32.mrf.mxu0
  %2366 = vmatprep.mubr.f32.mxu0 0.0
  %2367 = vmatmul.mubr.f32.gmra.mxu0 %v2104
  %v2368 = vpop.f32.mrf.mxu0
  %v2369 = vadd.f32 0.0, %v2368
  %v2370 = vpop.f32.mrf.mxu0
  %2371 = vmatprep.mubr.f32.mxu0 0.0
  %2372 = vmatmul.mubr.f32.gmra.mxu0 %v2107
  %v2373 = vpop.f32.mrf.mxu0
  %v2374 = vadd.f32 0.0, %v2373
  %v2375 = vpop.f32.mrf.mxu0
  %2376 = vmatprep.mubr.f32.mxu0 0.0
  %2377 = vmatmul.mubr.f32.gmra.mxu0 %v2110
  %v2378 = vpop.f32.mrf.mxu0
  %v2379 = vadd.f32 0.0, %v2378
  %v2380 = vpop.f32.mrf.mxu0
  %2381 = vmatprep.mubr.f32.mxu0 0.0
  %2382 = vmatmul.mubr.f32.gmra.mxu0 %v2113
  %v2383 = vpop.f32.mrf.mxu0
  %v2384 = vadd.f32 0.0, %v2383
  %v2385 = vpop.f32.mrf.mxu0
  %2386 = vmatprep.mubr.f32.mxu0 0.0
  %2387 = vmatmul.mubr.f32.gmra.mxu0 %v2116
  %v2388 = vpop.f32.mrf.mxu0
  %v2389 = vadd.f32 0.0, %v2388
  %v2390 = vpop.f32.mrf.mxu0
  %2391 = vmatprep.mubr.f32.mxu0 0.0
  %2392 = vmatmul.mubr.f32.gmra.mxu0 %v2119
  %v2393 = vpop.f32.mrf.mxu0
  %v2394 = vadd.f32 0.0, %v2393
  %v2395 = vpop.f32.mrf.mxu0
  %2396 = vmatprep.mubr.f32.mxu0 0.0
  %2397 = vmatmul.mubr.f32.gmra.mxu0 %v2122
  %v2398 = vpop.f32.mrf.mxu0
  %v2399 = vadd.f32 0.0, %v2398
  %v2400 = vpop.f32.mrf.mxu0
  %2401 = vmatprep.mubr.f32.mxu0 0.0
  %2402 = vmatmul.mubr.f32.gmra.mxu0 %v2125
  %v2403 = vpop.f32.mrf.mxu0
  %v2404 = vadd.f32 0.0, %v2403
  %v2405 = vpop.f32.mrf.mxu0
  %2406 = vmatprep.mubr.f32.mxu0 0.0
  %2407 = vmatmul.mubr.f32.gmra.mxu0 %v2128
  %v2408 = vpop.f32.mrf.mxu0
  %v2409 = vadd.f32 0.0, %v2408
  %v2410 = vpop.f32.mrf.mxu0
  %2411 = vmatprep.mubr.f32.mxu0 0.0
  %2412 = vmatmul.mubr.f32.gmra.mxu0 %v2131
  %v2413 = vpop.f32.mrf.mxu0
  %v2414 = vadd.f32 0.0, %v2413
  %v2415 = vpop.f32.mrf.mxu0
  %2416 = vmatprep.mubr.f32.mxu0 0.0
  %2417 = vmatmul.mubr.f32.gmra.mxu0 %v2134
  %v2418 = vpop.f32.mrf.mxu0
  %v2419 = vadd.f32 0.0, %v2418
  %v2420 = vpop.f32.mrf.mxu0
  %2421 = vmatprep.mubr.f32.mxu0 0.0
  %2422 = vmatmul.mubr.f32.gmra.mxu0 %v2137
  %v2423 = vpop.f32.mrf.mxu0
  %v2424 = vadd.f32 0.0, %v2423
  %v2425 = vpop.f32.mrf.mxu0
  %2426 = vmatprep.mubr.f32.mxu0 0.0
  %2427 = vmatmul.mubr.f32.gmra.mxu0 %v2140
  %v2428 = vpop.f32.mrf.mxu0
  %v2429 = vadd.f32 0.0, %v2428
  %v2430 = vpop.f32.mrf.mxu0
  %2431 = vmatprep.mubr.f32.mxu0 0.0
  %2432 = vmatmul.mubr.f32.gmra.mxu0 %v2143
  %v2433 = vpop.f32.mrf.mxu0
  %v2434 = vadd.f32 0.0, %v2433
  %v2435 = vpop.f32.mrf.mxu0
  %2436 = vmatprep.mubr.f32.mxu0 0.0
  %2437 = vmatmul.mubr.f32.gmra.mxu0 %v2146
  %v2438 = vpop.f32.mrf.mxu0
  %v2439 = vadd.f32 0.0, %v2438
  %v2440 = vpop.f32.mrf.mxu0
  %2441 = vmatprep.mubr.f32.mxu0 0.0
  %2442 = vmatmul.mubr.f32.gmra.mxu0 %v2149
  %v2443 = vpop.f32.mrf.mxu0
  %v2444 = vadd.f32 0.0, %v2443
  %v2445 = vpop.f32.mrf.mxu0
  %2446 = vmatprep.mubr.f32.mxu0 0.0
  %2447 = vmatmul.mubr.f32.gmra.mxu0 %v2152
  %v2448 = vpop.f32.mrf.mxu0
  %v2449 = vadd.f32 0.0, %v2448
  %v2450 = vpop.f32.mrf.mxu0
  %2451 = vmatprep.mubr.f32.mxu0 0.0
  %2452 = vmatmul.mubr.f32.gmra.mxu0 %v2155
  %v2453 = vpop.f32.mrf.mxu0
  %v2454 = vadd.f32 0.0, %v2453
  %v2455 = vpop.f32.mrf.mxu0
  %2456 = vmatprep.mubr.f32.mxu0 0.0
  %2457 = vmatmul.mubr.f32.gmra.mxu0 %v2158
  %v2458 = vpop.f32.mrf.mxu0
  %v2459 = vadd.f32 0.0, %v2458
  %v2460 = vpop.f32.mrf.mxu0
  %2461 = vmatprep.mubr.f32.mxu0 0.0
  %2462 = vmatmul.mubr.f32.gmra.mxu0 %v2161
  %v2463 = vpop.f32.mrf.mxu0
  %v2464 = vadd.f32 0.0, %v2463
  %v2465 = vpop.f32.mrf.mxu0
  %2466 = vmatprep.mubr.f32.mxu0 0.0
  %2467 = vmatmul.mubr.f32.gmra.mxu0 %v2164
  %v2468 = vpop.f32.mrf.mxu0
  %v2469 = vadd.f32 0.0, %v2468
  %v2470 = vpop.f32.mrf.mxu0
  %2471 = vmatprep.mubr.f32.mxu0 0.0
  %2472 = vmatmul.mubr.f32.gmra.mxu0 %v2167
  %v2473 = vpop.f32.mrf.mxu0
  %v2474 = vadd.f32 0.0, %v2473
  %v2475 = vpop.f32.mrf.mxu0
  %2476 = vmatprep.mubr.f32.mxu0 0.0
  %2477 = vmatmul.mubr.f32.gmra.mxu0 %v2170
  %v2478 = vpop.f32.mrf.mxu0
  %v2479 = vadd.f32 0.0, %v2478
  %v2480 = vpop.f32.mrf.mxu0
  %2481 = vmatprep.mubr.f32.mxu0 0.0
  %2482 = vmatmul.mubr.f32.gmra.mxu0 %v2173
  %v2483 = vpop.f32.mrf.mxu0
  %v2484 = vadd.f32 0.0, %v2483
  %v2485 = vpop.f32.mrf.mxu0
  %2486 = vmatprep.mubr.f32.mxu0 0.0
  %2487 = vmatmul.mubr.f32.gmra.mxu0 %v2176
  %v2488 = vpop.f32.mrf.mxu0
  %v2489 = vadd.f32 0.0, %v2488
  %v2490 = vpop.f32.mrf.mxu0
  %2491 = vmatprep.mubr.f32.mxu0 0.0
  %2492 = vmatmul.mubr.f32.gmra.mxu0 %v2179
  %v2493 = vpop.f32.mrf.mxu0
  %v2494 = vadd.f32 0.0, %v2493
  %v2495 = vpop.f32.mrf.mxu0
  %2496 = vmatprep.mubr.f32.mxu0 0.0
  %2497 = vmatmul.mubr.f32.gmra.mxu0 %v2182
  %v2498 = vpop.f32.mrf.mxu0
  %v2499 = vadd.f32 0.0, %v2498
  %v2500 = vpop.f32.mrf.mxu0
  %2501 = vmatprep.mubr.f32.mxu0 0.0
  %2502 = vmatmul.mubr.f32.gmra.mxu0 %v2185
  %v2503 = vpop.f32.mrf.mxu0
  %v2504 = vadd.f32 0.0, %v2503
  %v2505 = vpop.f32.mrf.mxu0
  %2506 = vmatprep.mubr.f32.mxu0 0.0
  %2507 = vmatmul.mubr.f32.gmra.mxu0 %v2188
  %v2508 = vpop.f32.mrf.mxu0
  %v2509 = vadd.f32 0.0, %v2508
  %v2510 = vpop.f32.mrf.mxu0
  %2511 = vmatprep.mubr.f32.mxu0 0.0
  %2512 = vmatmul.mubr.f32.gmra.mxu0 %v2191
  %v2513 = vpop.f32.mrf.mxu0
  %v2514 = vadd.f32 0.0, %v2513
  %v2515 = vpop.f32.mrf.mxu0
  %2516 = vmatprep.mubr.f32.mxu0 0.0
  %2517 = vmatmul.mubr.f32.gmra.mxu0 %v2194
  %v2518 = vpop.f32.mrf.mxu0
  %v2519 = vadd.f32 0.0, %v2518
  %v2520 = vpop.f32.mrf.mxu0
  %2521 = vmatprep.mubr.f32.mxu0 0.0
  %2522 = vmatmul.mubr.f32.gmra.mxu0 %v2197
  %v2523 = vpop.f32.mrf.mxu0
  %v2524 = vadd.f32 0.0, %v2523
  %v2525 = vpop.f32.mrf.mxu0
  %2526 = vmatprep.mubr.f32.mxu0 0.0
  %2527 = vmatmul.mubr.f32.gmra.mxu0 %v2200
  %v2528 = vpop.f32.mrf.mxu0
  %v2529 = vadd.f32 0.0, %v2528
  %v2530 = vpop.f32.mrf.mxu0
  %2531 = vmatprep.mubr.f32.mxu0 0.0
  %2532 = vmatmul.mubr.f32.gmra.mxu0 %v2203
  %v2533 = vpop.f32.mrf.mxu0
  %v2534 = vadd.f32 0.0, %v2533
  %v2535 = vpop.f32.mrf.mxu0
  %2536 = vmatprep.mubr.f32.mxu0 0.0
  %2537 = vmatmul.mubr.f32.gmra.mxu0 %v2206
  %v2538 = vpop.f32.mrf.mxu0
  %v2539 = vadd.f32 0.0, %v2538
  %v2540 = vpop.f32.mrf.mxu0
  %2541 = vmatprep.mubr.f32.mxu0 0.0
  %2542 = vmatmul.mubr.f32.gmra.mxu0 %v2209
  %v2543 = vpop.f32.mrf.mxu0
  %v2544 = vadd.f32 0.0, %v2543
  %v2545 = vpop.f32.mrf.mxu0
  %2546 = vmatprep.mubr.f32.mxu0 0.0
  %2547 = vmatmul.mubr.f32.gmra.mxu0 %v2212
  %v2548 = vpop.f32.mrf.mxu0
  %v2549 = vadd.f32 0.0, %v2548
  %v2550 = vpop.f32.mrf.mxu0
  %2551 = vmatprep.mubr.f32.mxu0 0.0
  %2552 = vmatmul.mubr.f32.gmra.mxu0 %v2215
  %v2553 = vpop.f32.mrf.mxu0
  %v2554 = vadd.f32 0.0, %v2553
  %v2555 = vpop.f32.mrf.mxu0
  %2556 = vmatprep.mubr.f32.mxu0 0.0
  %2557 = vmatmul.mubr.f32.gmra.mxu0 %v2218
  %v2558 = vpop.f32.mrf.mxu0
  %v2559 = vadd.f32 0.0, %v2558
  %v2560 = vpop.f32.mrf.mxu0
  %2561 = vmatprep.mubr.f32.mxu0 0.0
  %2562 = vmatmul.mubr.f32.gmra.mxu0 %v2221
  %v2563 = vpop.f32.mrf.mxu0
  %v2564 = vadd.f32 0.0, %v2563
  %v2565 = vpop.f32.mrf.mxu0
  %2566 = vmatprep.mubr.f32.mxu0 0.0
  %2567 = vmatmul.mubr.f32.gmra.mxu0 %v2224
  %v2568 = vpop.f32.mrf.mxu0
  %v2569 = vadd.f32 0.0, %v2568
  %v2570 = vpop.f32.mrf.mxu0
  %2571 = vmatprep.mubr.f32.mxu0 0.0
  %2572 = vmatmul.mubr.f32.gmra.mxu0 %v2227
  %v2573 = vpop.f32.mrf.mxu0
  %v2574 = vadd.f32 0.0, %v2573
  %v2575 = vpop.f32.mrf.mxu0
  %2576 = vmatprep.mubr.f32.mxu0 0.0
  %2577 = vmatmul.mubr.f32.gmra.mxu0 %v2230
  %v2578 = vpop.f32.mrf.mxu0
  %v2579 = vadd.f32 0.0, %v2578
  %v2580 = vpop.f32.mrf.mxu0
  %2581 = vmatprep.mubr.f32.mxu0 0.0
  %2582 = vmatmul.mubr.f32.gmra.mxu0 %v2233
  %v2583 = vpop.f32.mrf.mxu0
  %v2584 = vadd.f32 0.0, %v2583
  %v2585 = vpop.f32.mrf.mxu0
  %2586 = vmatprep.mubr.f32.mxu0 0.0
  %2587 = vmatmul.mubr.f32.gmra.mxu0 %v2236
  %v2588 = vpop.f32.mrf.mxu0
  %v2589 = vadd.f32 0.0, %v2588
  %v2590 = vpop.f32.mrf.mxu0
  %2591 = vmatprep.mubr.f32.mxu0 0.0
  %2592 = vmatmul.mubr.f32.gmra.mxu0 %v2239
  %v2593 = vpop.f32.mrf.mxu0
  %v2594 = vadd.f32 0.0, %v2593
  %v2595 = vpop.f32.mrf.mxu0
  %2596 = vmatprep.mubr.f32.mxu0 0.0
  %2597 = vmatmul.mubr.f32.gmra.mxu0 %v2242
  %v2598 = vpop.f32.mrf.mxu0
  %v2599 = vadd.f32 0.0, %v2598
  %v2600 = vpop.f32.mrf.mxu0
  %2601 = vmatprep.mubr.f32.mxu0 0.0
  %2602 = vmatmul.mubr.f32.gmra.mxu0 %v2245
  %v2603 = vpop.f32.mrf.mxu0
  %v2604 = vadd.f32 0.0, %v2603
  %v2605 = vpop.f32.mrf.mxu0
  %2606 = vmatprep.mubr.f32.mxu0 0.0
  %2607 = vmatmul.mubr.f32.gmra.mxu0 %v2248
  %v2608 = vpop.f32.mrf.mxu0
  %v2609 = vadd.f32 0.0, %v2608
  %v2610 = vpop.f32.mrf.mxu0
  %2611 = vmatprep.mubr.f32.mxu0 0.0
  %2612 = vmatmul.mubr.f32.gmra.mxu0 %v2251
  %v2613 = vpop.f32.mrf.mxu0
  %v2614 = vadd.f32 0.0, %v2613
  %v2615 = vpop.f32.mrf.mxu0
  %2616 = vmatprep.mubr.f32.mxu0 0.0
  %2617 = vmatmul.mubr.f32.gmra.mxu0 %v2254
  %v2618 = vpop.f32.mrf.mxu0
  %v2619 = vadd.f32 0.0, %v2618
  %v2620 = vpop.f32.mrf.mxu0
  %2621 = vmatprep.mubr.f32.mxu0 0.0
  %2622 = vmatmul.mubr.f32.gmra.mxu0 %v2257
  %v2623 = vpop.f32.mrf.mxu0
  %v2624 = vadd.f32 0.0, %v2623
  %v2625 = vpop.f32.mrf.mxu0
  %2626 = vmatprep.mubr.f32.mxu0 0.0
  %2627 = vmatmul.mubr.f32.gmra.mxu0 %v2260
  %v2628 = vpop.f32.mrf.mxu0
  %v2629 = vadd.f32 0.0, %v2628
  %v2630 = vpop.f32.mrf.mxu0
  %2631 = vmatprep.mubr.f32.mxu0 0.0
  %2632 = vmatmul.mubr.f32.gmra.mxu0 %v2263
  %v2633 = vpop.f32.mrf.mxu0
  %v2634 = vadd.f32 0.0, %v2633
  %v2635 = vpop.f32.mrf.mxu0
  %2636 = vmatprep.mubr.f32.mxu0 0.0
  %2637 = vmatmul.mubr.f32.gmra.mxu0 %v2266
  %v2638 = vpop.f32.mrf.mxu0
  %v2639 = vadd.f32 0.0, %v2638
  %v2640 = vpop.f32.mrf.mxu0
  %2641 = vmatprep.mubr.f32.mxu0 0.0
  %2642 = vmatmul.mubr.f32.gmra.mxu0 %v2269
  %v2643 = vpop.f32.mrf.mxu0
  %v2644 = vadd.f32 0.0, %v2643
  %v2645 = vpop.f32.mrf.mxu0
  %2646 = vmatprep.mubr.f32.mxu0 0.0
  %2647 = vmatmul.mubr.f32.gmra.mxu0 %v2272
  %v2648 = vpop.f32.mrf.mxu0
  %v2649 = vadd.f32 0.0, %v2648
  %v2650 = vpop.f32.mrf.mxu0
  %2651 = vmatprep.mubr.f32.mxu0 0.0
  %2652 = vmatmul.mubr.f32.gmra.mxu0 %v2275
  %v2653 = vpop.f32.mrf.mxu0
  %v2654 = vadd.f32 0.0, %v2653
  %v2655 = vpop.f32.mrf.mxu0
  %2656 = vmatprep.mubr.f32.mxu0 0.0
  %2657 = vmatmul.mubr.f32.gmra.mxu0 %v2278
  %v2658 = vpop.f32.mrf.mxu0
  %v2659 = vadd.f32 0.0, %v2658
  %v2660 = vpop.f32.mrf.mxu0
  %2661 = vmatprep.mubr.f32.mxu0 0.0
  %2662 = vmatmul.mubr.f32.gmra.mxu0 %v2281
  %v2663 = vpop.f32.mrf.mxu0
  %v2664 = vadd.f32 0.0, %v2663
  %v2665 = vpop.f32.mrf.mxu0
  %2666 = vmatprep.mubr.f32.mxu0 0.0
  %2667 = vmatmul.mubr.f32.gmra.mxu0 %v2284
  %v2668 = vpop.f32.mrf.mxu0
  %v2669 = vadd.f32 0.0, %v2668
  %v2670 = vpop.f32.mrf.mxu0
  %2671 = vmatprep.mubr.f32.mxu0 0.0
  %2672 = vmatmul.mubr.f32.gmra.mxu0 %v2287
  %v2673 = vpop.f32.mrf.mxu0
  %v2674 = vadd.f32 0.0, %v2673
  %v2675 = vpop.f32.mrf.mxu0
  %2676 = vdwg.mxu0
  %v2677 = vadd.f32 %v1966, %v2359
  %v2678 = vadd.f32 %v1967, %v2364
  %v2679 = vadd.f32 %v1968, %v2369
  %v2680 = vadd.f32 %v1969, %v2374
  %v2681 = vadd.f32 %v1970, %v2379
  %v2682 = vadd.f32 %v1971, %v2384
  %v2683 = vadd.f32 %v1972, %v2389
  %v2684 = vadd.f32 %v1973, %v2394
  %v2685 = vadd.f32 %v1974, %v2399
  %v2686 = vadd.f32 %v1975, %v2404
  %v2687 = vadd.f32 %v1976, %v2409
  %v2688 = vadd.f32 %v1977, %v2414
  %v2689 = vadd.f32 %v1978, %v2419
  %v2690 = vadd.f32 %v1979, %v2424
  %v2691 = vadd.f32 %v1980, %v2429
  %v2692 = vadd.f32 %v1981, %v2434
  %v2693 = vadd.f32 %v1982, %v2439
  %v2694 = vadd.f32 %v1983, %v2444
  %v2695 = vadd.f32 %v1984, %v2449
  %v2696 = vadd.f32 %v1985, %v2454
  %v2697 = vadd.f32 %v1986, %v2459
  %v2698 = vadd.f32 %v1987, %v2464
  %v2699 = vadd.f32 %v1988, %v2469
  %v2700 = vadd.f32 %v1989, %v2474
  %v2701 = vadd.f32 %v1990, %v2479
  %v2702 = vadd.f32 %v1991, %v2484
  %v2703 = vadd.f32 %v1992, %v2489
  %v2704 = vadd.f32 %v1993, %v2494
  %v2705 = vadd.f32 %v1994, %v2499
  %v2706 = vadd.f32 %v1995, %v2504
  %v2707 = vadd.f32 %v1996, %v2509
  %v2708 = vadd.f32 %v1997, %v2514
  %v2709 = vadd.f32 %v1998, %v2519
  %v2710 = vadd.f32 %v1999, %v2524
  %v2711 = vadd.f32 %v2000, %v2529
  %v2712 = vadd.f32 %v2001, %v2534
  %v2713 = vadd.f32 %v2002, %v2539
  %v2714 = vadd.f32 %v2003, %v2544
  %v2715 = vadd.f32 %v2004, %v2549
  %v2716 = vadd.f32 %v2005, %v2554
  %v2717 = vadd.f32 %v2006, %v2559
  %v2718 = vadd.f32 %v2007, %v2564
  %v2719 = vadd.f32 %v2008, %v2569
  %v2720 = vadd.f32 %v2009, %v2574
  %v2721 = vadd.f32 %v2010, %v2579
  %v2722 = vadd.f32 %v2011, %v2584
  %v2723 = vadd.f32 %v2012, %v2589
  %v2724 = vadd.f32 %v2013, %v2594
  %v2725 = vadd.f32 %v2014, %v2599
  %v2726 = vadd.f32 %v2015, %v2604
  %v2727 = vadd.f32 %v2016, %v2609
  %v2728 = vadd.f32 %v2017, %v2614
  %v2729 = vadd.f32 %v2018, %v2619
  %v2730 = vadd.f32 %v2019, %v2624
  %v2731 = vadd.f32 %v2020, %v2629
  %v2732 = vadd.f32 %v2021, %v2634
  %v2733 = vadd.f32 %v2022, %v2639
  %v2734 = vadd.f32 %v2023, %v2644
  %v2735 = vadd.f32 %v2024, %v2649
  %v2736 = vadd.f32 %v2025, %v2654
  %v2737 = vadd.f32 %v2026, %v2659
  %v2738 = vadd.f32 %v2027, %v2664
  %v2739 = vadd.f32 %v2028, %v2669
  %v2740 = vadd.f32 %v2029, %v2674
  %v2741 = vld [vmem:[%s2030 + $0x1] sm:$0xff]
  %v2742 = vld [vmem:[%s2030 + $0x9] sm:$0xff]
  %v2743 = vld [vmem:[%s2030 + $0x19] sm:$0xff]
  %v2744 = vld [vmem:[%s2030 + $0x21] sm:$0xff]
  %v2745 = vld [vmem:[%s2030 + $0x31] sm:$0xff]
  %v2746 = vld [vmem:[%s2030 + $0x39] sm:$0xff]
  %v2747 = vld [vmem:[%s2030 + $0x49] sm:$0xff]
  %v2748 = vld [vmem:[%s2030 + $0x51] sm:$0xff]
  %v2749 = vld [vmem:[%s2030 + $0x61] sm:$0xff]
  %v2750 = vld [vmem:[%s2030 + $0x69] sm:$0xff]
  %v2751 = vld [vmem:[%s2030 + $0x79] sm:$0xff]
  %v2752 = vld [vmem:[%s2030 + $0x81] sm:$0xff]
  %v2753 = vld [vmem:[%s2030 + $0x91] sm:$0xff]
  %v2754 = vld [vmem:[%s2030 + $0x99] sm:$0xff]
  %v2755 = vld [vmem:[%s2030 + $0xa9] sm:$0xff]
  %v2756 = vld [vmem:[%s2030 + $0xb1] sm:$0xff]
  %v2757 = vld [vmem:[%s2030 + $0xc1] sm:$0xff]
  %v2758 = vld [vmem:[%s2030 + $0xc9] sm:$0xff]
  %v2759 = vld [vmem:[%s2030 + $0xd9] sm:$0xff]
  %v2760 = vld [vmem:[%s2030 + $0xe1] sm:$0xff]
  %v2761 = vld [vmem:[%s2030 + $0xf1] sm:$0xff]
  %v2762 = vld [vmem:[%s2030 + $0xf9] sm:$0xff]
  %v2763 = vld [vmem:[%s2030 + $0x109] sm:$0xff]
  %v2764 = vld [vmem:[%s2030 + $0x111] sm:$0xff]
  %v2765 = vld [vmem:[%s2030 + $0x121] sm:$0xff]
  %v2766 = vld [vmem:[%s2030 + $0x129] sm:$0xff]
  %v2767 = vld [vmem:[%s2030 + $0x139] sm:$0xff]
  %v2768 = vld [vmem:[%s2030 + $0x141] sm:$0xff]
  %v2769 = vld [vmem:[%s2030 + $0x151] sm:$0xff]
  %v2770 = vld [vmem:[%s2030 + $0x159] sm:$0xff]
  %v2771 = vld [vmem:[%s2030 + $0x169] sm:$0xff]
  %v2772 = vld [vmem:[%s2030 + $0x171] sm:$0xff]
  %v2773 = vld [vmem:[%s2030 + $0x1b1] sm:$0xff]
  %v2774 = vld [vmem:[%s2030 + $0x1b9] sm:$0xff]
  %v2775 = vld [vmem:[%s2030 + $0x1c9] sm:$0xff]
  %v2776 = vld [vmem:[%s2030 + $0x1d1] sm:$0xff]
  %v2777 = vld [vmem:[%s2030 + $0x1e1] sm:$0xff]
  %v2778 = vld [vmem:[%s2030 + $0x1e9] sm:$0xff]
  %v2779 = vld [vmem:[%s2030 + $0x1f9] sm:$0xff]
  %v2780 = vld [vmem:[%s2030 + $0x201] sm:$0xff]
  %v2781 = vld [vmem:[%s2030 + $0x211] sm:$0xff]
  %v2782 = vld [vmem:[%s2030 + $0x219] sm:$0xff]
  %v2783 = vld [vmem:[%s2030 + $0x229] sm:$0xff]
  %v2784 = vld [vmem:[%s2030 + $0x231] sm:$0xff]
  %v2785 = vld [vmem:[%s2030 + $0x241] sm:$0xff]
  %v2786 = vld [vmem:[%s2030 + $0x249] sm:$0xff]
  %v2787 = vld [vmem:[%s2030 + $0x259] sm:$0xff]
  %v2788 = vld [vmem:[%s2030 + $0x261] sm:$0xff]
  %v2789 = vld [vmem:[%s2030 + $0x271] sm:$0xff]
  %v2790 = vld [vmem:[%s2030 + $0x279] sm:$0xff]
  %v2791 = vld [vmem:[%s2030 + $0x289] sm:$0xff]
  %v2792 = vld [vmem:[%s2030 + $0x291] sm:$0xff]
  %v2793 = vld [vmem:[%s2030 + $0x2a1] sm:$0xff]
  %v2794 = vld [vmem:[%s2030 + $0x2a9] sm:$0xff]
  %v2795 = vld [vmem:[%s2030 + $0x2b9] sm:$0xff]
  %v2796 = vld [vmem:[%s2030 + $0x2c1] sm:$0xff]
  %v2797 = vld [vmem:[%s2030 + $0x2d1] sm:$0xff]
  %v2798 = vld [vmem:[%s2030 + $0x2d9] sm:$0xff]
  %v2799 = vld [vmem:[%s2030 + $0x2e9] sm:$0xff]
  %v2800 = vld [vmem:[%s2030 + $0x2f1] sm:$0xff]
  %v2801 = vld [vmem:[%s2030 + $0x301] sm:$0xff]
  %v2802 = vld [vmem:[%s2030 + $0x309] sm:$0xff]
  %v2803 = vld [vmem:[%s2030 + $0x319] sm:$0xff]
  %v2804 = vld [vmem:[%s2030 + $0x321] sm:$0xff]
  %s2805 = scalar_lea.vmem %s1, 16
  %v2806 = vld [vmem:[%s2805] sm:$0xf]
  %v2808 = vsel %vm158, %v2741, 0
  %v2811 = vsel %vm158, %v2742, 0
  %v2814 = vsel %vm158, %v2743, 0
  %v2817 = vsel %vm158, %v2744, 0
  %v2820 = vsel %vm158, %v2745, 0
  %v2823 = vsel %vm158, %v2746, 0
  %v2826 = vsel %vm158, %v2747, 0
  %v2829 = vsel %vm158, %v2748, 0
  %v2832 = vsel %vm158, %v2749, 0
  %v2835 = vsel %vm158, %v2750, 0
  %v2838 = vsel %vm158, %v2751, 0
  %v2841 = vsel %vm158, %v2752, 0
  %v2844 = vsel %vm158, %v2753, 0
  %v2847 = vsel %vm158, %v2754, 0
  %v2850 = vsel %vm158, %v2755, 0
  %v2853 = vsel %vm158, %v2756, 0
  %v2856 = vsel %vm158, %v2757, 0
  %v2859 = vsel %vm158, %v2758, 0
  %v2862 = vsel %vm158, %v2759, 0
  %v2865 = vsel %vm158, %v2760, 0
  %v2868 = vsel %vm158, %v2761, 0
  %v2871 = vsel %vm158, %v2762, 0
  %v2874 = vsel %vm158, %v2763, 0
  %v2877 = vsel %vm158, %v2764, 0
  %v2880 = vsel %vm158, %v2765, 0
  %v2883 = vsel %vm158, %v2766, 0
  %v2886 = vsel %vm158, %v2767, 0
  %v2889 = vsel %vm158, %v2768, 0
  %v2892 = vsel %vm158, %v2769, 0
  %v2895 = vsel %vm158, %v2770, 0
  %v2898 = vsel %vm158, %v2771, 0
  %v2901 = vsel %vm158, %v2772, 0
  %v2904 = vsel %vm158, %v2773, 0
  %v2907 = vsel %vm158, %v2774, 0
  %v2910 = vsel %vm158, %v2775, 0
  %v2913 = vsel %vm158, %v2776, 0
  %v2916 = vsel %vm158, %v2777, 0
  %v2919 = vsel %vm158, %v2778, 0
  %v2922 = vsel %vm158, %v2779, 0
  %v2925 = vsel %vm158, %v2780, 0
  %v2928 = vsel %vm158, %v2781, 0
  %v2931 = vsel %vm158, %v2782, 0
  %v2934 = vsel %vm158, %v2783, 0
  %v2937 = vsel %vm158, %v2784, 0
  %v2940 = vsel %vm158, %v2785, 0
  %v2943 = vsel %vm158, %v2786, 0
  %v2946 = vsel %vm158, %v2787, 0
  %v2949 = vsel %vm158, %v2788, 0
  %v2952 = vsel %vm158, %v2789, 0
  %v2955 = vsel %vm158, %v2790, 0
  %v2958 = vsel %vm158, %v2791, 0
  %v2961 = vsel %vm158, %v2792, 0
  %v2964 = vsel %vm158, %v2793, 0
  %v2967 = vsel %vm158, %v2794, 0
  %v2970 = vsel %vm158, %v2795, 0
  %v2973 = vsel %vm158, %v2796, 0
  %v2976 = vsel %vm158, %v2797, 0
  %v2979 = vsel %vm158, %v2798, 0
  %v2982 = vsel %vm158, %v2799, 0
  %v2985 = vsel %vm158, %v2800, 0
  %v2988 = vsel %vm158, %v2801, 0
  %v2991 = vsel %vm158, %v2802, 0
  %v2994 = vsel %vm158, %v2803, 0
  %v2997 = vsel %vm158, %v2804, 0
  %v3000 = vsel %vm351, %v2806, 0
  %3002 = vmatprep.subr.mxu0 0.0
  %3003 = vmatpush1.msra.mxu0 0.0
  %3004 = vmatprep.subr.mxu0 0.0
  %3005 = vmatpush1.msra.mxu0 0.0
  %3006 = vmatprep.subr.mxu0 0.0
  %3007 = vmatpush1.msra.mxu0 0.0
  %3008 = vmatprep.subr.mxu0 0.0
  %3009 = vmatpush1.msra.mxu0 0.0
  %3010 = vmatprep.subr.mxu0 0.0
  %3011 = vmatpush1.msra.mxu0 0.0
  %3012 = vmatprep.subr.mxu0 0.0
  %3013 = vmatpush1.msra.mxu0 0.0
  %3014 = vmatprep.subr.mxu0 0.0
  %3015 = vmatpush1.msra.mxu0 0.0
  %3016 = vmatprep.subr.mxu0 0.0
  %3017 = vmatpush1.msra.mxu0 0.0
  %3018 = vmatprep.subr.mxu0 0.0
  %3019 = vmatpush1.msra.mxu0 0.0
  %3020 = vmatprep.subr.mxu0 0.0
  %3021 = vmatpush1.msra.mxu0 0.0
  %3022 = vmatprep.subr.mxu0 0.0
  %3023 = vmatpush1.msra.mxu0 0.0
  %3024 = vmatprep.subr.mxu0 0.0
  %3025 = vmatpush1.msra.mxu0 0.0
  %3026 = vmatprep.subr.mxu0 0.0
  %3027 = vmatpush1.msra.mxu0 0.0
  %3028 = vmatprep.subr.mxu0 0.0
  %3029 = vmatpush1.msra.mxu0 0.0
  %3030 = vmatprep.subr.mxu0 0.0
  %3031 = vmatpush1.msra.mxu0 0.0
  %3032 = vmatprep.subr.mxu0 0.0
  %3033 = vmatpush1.msra.mxu0 %v3000
  %3034 = vmatprep.subr.mxu0 0.0
  %3035 = vmatpush2.msra.mxu0 0.0
  %3036 = vmatprep.subr.mxu0 0.0
  %3037 = vmatpush2.msra.mxu0 0.0
  %3038 = vmatprep.subr.mxu0 0.0
  %3039 = vmatpush2.msra.mxu0 0.0
  %3040 = vmatprep.subr.mxu0 0.0
  %3041 = vmatpush2.msra.mxu0 0.0
  %3042 = vmatprep.subr.mxu0 0.0
  %3043 = vmatpush2.msra.mxu0 0.0
  %3044 = vmatprep.subr.mxu0 0.0
  %3045 = vmatpush2.msra.mxu0 0.0
  %3046 = vmatprep.subr.mxu0 0.0
  %3047 = vmatpush2.msra.mxu0 0.0
  %3048 = vmatprep.subr.mxu0 0.0
  %3049 = vmatpush2.msra.mxu0 0.0
  %3050 = vmatprep.subr.mxu0 0.0
  %3051 = vmatpush2.msra.mxu0 0.0
  %3052 = vmatprep.subr.mxu0 0.0
  %3053 = vmatpush2.msra.mxu0 0.0
  %3054 = vmatprep.subr.mxu0 0.0
  %3055 = vmatpush2.msra.mxu0 0.0
  %3056 = vmatprep.subr.mxu0 0.0
  %3057 = vmatpush2.msra.mxu0 0.0
  %3058 = vmatprep.subr.mxu0 0.0
  %3059 = vmatpush2.msra.mxu0 0.0
  %3060 = vmatprep.subr.mxu0 0.0
  %3061 = vmatpush2.msra.mxu0 0.0
  %3062 = vmatprep.subr.mxu0 0.0
  %3063 = vmatpush2.msra.mxu0 0.0
  %3064 = vmatprep.subr.mxu0 0.0
  %3065 = vmatpush2.msra.mxu0 0.0
  %3066 = vmatprep.mubr.f32.mxu0 0.0
  %3067 = vmatmul.mubr.f32.gmra.mxu0 %v2808
  %v3068 = vpop.f32.mrf.mxu0
  %v3069 = vadd.f32 0.0, %v3068
  %v3070 = vpop.f32.mrf.mxu0
  %3071 = vmatprep.mubr.f32.mxu0 0.0
  %3072 = vmatmul.mubr.f32.gmra.mxu0 %v2811
  %v3073 = vpop.f32.mrf.mxu0
  %v3074 = vadd.f32 0.0, %v3073
  %v3075 = vpop.f32.mrf.mxu0
  %3076 = vmatprep.mubr.f32.mxu0 0.0
  %3077 = vmatmul.mubr.f32.gmra.mxu0 %v2814
  %v3078 = vpop.f32.mrf.mxu0
  %v3079 = vadd.f32 0.0, %v3078
  %v3080 = vpop.f32.mrf.mxu0
  %3081 = vmatprep.mubr.f32.mxu0 0.0
  %3082 = vmatmul.mubr.f32.gmra.mxu0 %v2817
  %v3083 = vpop.f32.mrf.mxu0
  %v3084 = vadd.f32 0.0, %v3083
  %v3085 = vpop.f32.mrf.mxu0
  %3086 = vmatprep.mubr.f32.mxu0 0.0
  %3087 = vmatmul.mubr.f32.gmra.mxu0 %v2820
  %v3088 = vpop.f32.mrf.mxu0
  %v3089 = vadd.f32 0.0, %v3088
  %v3090 = vpop.f32.mrf.mxu0
  %3091 = vmatprep.mubr.f32.mxu0 0.0
  %3092 = vmatmul.mubr.f32.gmra.mxu0 %v2823
  %v3093 = vpop.f32.mrf.mxu0
  %v3094 = vadd.f32 0.0, %v3093
  %v3095 = vpop.f32.mrf.mxu0
  %3096 = vmatprep.mubr.f32.mxu0 0.0
  %3097 = vmatmul.mubr.f32.gmra.mxu0 %v2826
  %v3098 = vpop.f32.mrf.mxu0
  %v3099 = vadd.f32 0.0, %v3098
  %v3100 = vpop.f32.mrf.mxu0
  %3101 = vmatprep.mubr.f32.mxu0 0.0
  %3102 = vmatmul.mubr.f32.gmra.mxu0 %v2829
  %v3103 = vpop.f32.mrf.mxu0
  %v3104 = vadd.f32 0.0, %v3103
  %v3105 = vpop.f32.mrf.mxu0
  %3106 = vmatprep.mubr.f32.mxu0 0.0
  %3107 = vmatmul.mubr.f32.gmra.mxu0 %v2832
  %v3108 = vpop.f32.mrf.mxu0
  %v3109 = vadd.f32 0.0, %v3108
  %v3110 = vpop.f32.mrf.mxu0
  %3111 = vmatprep.mubr.f32.mxu0 0.0
  %3112 = vmatmul.mubr.f32.gmra.mxu0 %v2835
  %v3113 = vpop.f32.mrf.mxu0
  %v3114 = vadd.f32 0.0, %v3113
  %v3115 = vpop.f32.mrf.mxu0
  %3116 = vmatprep.mubr.f32.mxu0 0.0
  %3117 = vmatmul.mubr.f32.gmra.mxu0 %v2838
  %v3118 = vpop.f32.mrf.mxu0
  %v3119 = vadd.f32 0.0, %v3118
  %v3120 = vpop.f32.mrf.mxu0
  %3121 = vmatprep.mubr.f32.mxu0 0.0
  %3122 = vmatmul.mubr.f32.gmra.mxu0 %v2841
  %v3123 = vpop.f32.mrf.mxu0
  %v3124 = vadd.f32 0.0, %v3123
  %v3125 = vpop.f32.mrf.mxu0
  %3126 = vmatprep.mubr.f32.mxu0 0.0
  %3127 = vmatmul.mubr.f32.gmra.mxu0 %v2844
  %v3128 = vpop.f32.mrf.mxu0
  %v3129 = vadd.f32 0.0, %v3128
  %v3130 = vpop.f32.mrf.mxu0
  %3131 = vmatprep.mubr.f32.mxu0 0.0
  %3132 = vmatmul.mubr.f32.gmra.mxu0 %v2847
  %v3133 = vpop.f32.mrf.mxu0
  %v3134 = vadd.f32 0.0, %v3133
  %v3135 = vpop.f32.mrf.mxu0
  %3136 = vmatprep.mubr.f32.mxu0 0.0
  %3137 = vmatmul.mubr.f32.gmra.mxu0 %v2850
  %v3138 = vpop.f32.mrf.mxu0
  %v3139 = vadd.f32 0.0, %v3138
  %v3140 = vpop.f32.mrf.mxu0
  %3141 = vmatprep.mubr.f32.mxu0 0.0
  %3142 = vmatmul.mubr.f32.gmra.mxu0 %v2853
  %v3143 = vpop.f32.mrf.mxu0
  %v3144 = vadd.f32 0.0, %v3143
  %v3145 = vpop.f32.mrf.mxu0
  %3146 = vmatprep.mubr.f32.mxu0 0.0
  %3147 = vmatmul.mubr.f32.gmra.mxu0 %v2856
  %v3148 = vpop.f32.mrf.mxu0
  %v3149 = vadd.f32 0.0, %v3148
  %v3150 = vpop.f32.mrf.mxu0
  %3151 = vmatprep.mubr.f32.mxu0 0.0
  %3152 = vmatmul.mubr.f32.gmra.mxu0 %v2859
  %v3153 = vpop.f32.mrf.mxu0
  %v3154 = vadd.f32 0.0, %v3153
  %v3155 = vpop.f32.mrf.mxu0
  %3156 = vmatprep.mubr.f32.mxu0 0.0
  %3157 = vmatmul.mubr.f32.gmra.mxu0 %v2862
  %v3158 = vpop.f32.mrf.mxu0
  %v3159 = vadd.f32 0.0, %v3158
  %v3160 = vpop.f32.mrf.mxu0
  %3161 = vmatprep.mubr.f32.mxu0 0.0
  %3162 = vmatmul.mubr.f32.gmra.mxu0 %v2865
  %v3163 = vpop.f32.mrf.mxu0
  %v3164 = vadd.f32 0.0, %v3163
  %v3165 = vpop.f32.mrf.mxu0
  %3166 = vmatprep.mubr.f32.mxu0 0.0
  %3167 = vmatmul.mubr.f32.gmra.mxu0 %v2868
  %v3168 = vpop.f32.mrf.mxu0
  %v3169 = vadd.f32 0.0, %v3168
  %v3170 = vpop.f32.mrf.mxu0
  %3171 = vmatprep.mubr.f32.mxu0 0.0
  %3172 = vmatmul.mubr.f32.gmra.mxu0 %v2871
  %v3173 = vpop.f32.mrf.mxu0
  %v3174 = vadd.f32 0.0, %v3173
  %v3175 = vpop.f32.mrf.mxu0
  %3176 = vmatprep.mubr.f32.mxu0 0.0
  %3177 = vmatmul.mubr.f32.gmra.mxu0 %v2874
  %v3178 = vpop.f32.mrf.mxu0
  %v3179 = vadd.f32 0.0, %v3178
  %v3180 = vpop.f32.mrf.mxu0
  %3181 = vmatprep.mubr.f32.mxu0 0.0
  %3182 = vmatmul.mubr.f32.gmra.mxu0 %v2877
  %v3183 = vpop.f32.mrf.mxu0
  %v3184 = vadd.f32 0.0, %v3183
  %v3185 = vpop.f32.mrf.mxu0
  %3186 = vmatprep.mubr.f32.mxu0 0.0
  %3187 = vmatmul.mubr.f32.gmra.mxu0 %v2880
  %v3188 = vpop.f32.mrf.mxu0
  %v3189 = vadd.f32 0.0, %v3188
  %v3190 = vpop.f32.mrf.mxu0
  %3191 = vmatprep.mubr.f32.mxu0 0.0
  %3192 = vmatmul.mubr.f32.gmra.mxu0 %v2883
  %v3193 = vpop.f32.mrf.mxu0
  %v3194 = vadd.f32 0.0, %v3193
  %v3195 = vpop.f32.mrf.mxu0
  %3196 = vmatprep.mubr.f32.mxu0 0.0
  %3197 = vmatmul.mubr.f32.gmra.mxu0 %v2886
  %v3198 = vpop.f32.mrf.mxu0
  %v3199 = vadd.f32 0.0, %v3198
  %v3200 = vpop.f32.mrf.mxu0
  %3201 = vmatprep.mubr.f32.mxu0 0.0
  %3202 = vmatmul.mubr.f32.gmra.mxu0 %v2889
  %v3203 = vpop.f32.mrf.mxu0
  %v3204 = vadd.f32 0.0, %v3203
  %v3205 = vpop.f32.mrf.mxu0
  %3206 = vmatprep.mubr.f32.mxu0 0.0
  %3207 = vmatmul.mubr.f32.gmra.mxu0 %v2892
  %v3208 = vpop.f32.mrf.mxu0
  %v3209 = vadd.f32 0.0, %v3208
  %v3210 = vpop.f32.mrf.mxu0
  %3211 = vmatprep.mubr.f32.mxu0 0.0
  %3212 = vmatmul.mubr.f32.gmra.mxu0 %v2895
  %v3213 = vpop.f32.mrf.mxu0
  %v3214 = vadd.f32 0.0, %v3213
  %v3215 = vpop.f32.mrf.mxu0
  %3216 = vmatprep.mubr.f32.mxu0 0.0
  %3217 = vmatmul.mubr.f32.gmra.mxu0 %v2898
  %v3218 = vpop.f32.mrf.mxu0
  %v3219 = vadd.f32 0.0, %v3218
  %v3220 = vpop.f32.mrf.mxu0
  %3221 = vmatprep.mubr.f32.mxu0 0.0
  %3222 = vmatmul.mubr.f32.gmra.mxu0 %v2901
  %v3223 = vpop.f32.mrf.mxu0
  %v3224 = vadd.f32 0.0, %v3223
  %v3225 = vpop.f32.mrf.mxu0
  %3226 = vmatprep.mubr.f32.mxu0 0.0
  %3227 = vmatmul.mubr.f32.gmra.mxu0 %v2904
  %v3228 = vpop.f32.mrf.mxu0
  %v3229 = vadd.f32 0.0, %v3228
  %v3230 = vpop.f32.mrf.mxu0
  %3231 = vmatprep.mubr.f32.mxu0 0.0
  %3232 = vmatmul.mubr.f32.gmra.mxu0 %v2907
  %v3233 = vpop.f32.mrf.mxu0
  %v3234 = vadd.f32 0.0, %v3233
  %v3235 = vpop.f32.mrf.mxu0
  %3236 = vmatprep.mubr.f32.mxu0 0.0
  %3237 = vmatmul.mubr.f32.gmra.mxu0 %v2910
  %v3238 = vpop.f32.mrf.mxu0
  %v3239 = vadd.f32 0.0, %v3238
  %v3240 = vpop.f32.mrf.mxu0
  %3241 = vmatprep.mubr.f32.mxu0 0.0
  %3242 = vmatmul.mubr.f32.gmra.mxu0 %v2913
  %v3243 = vpop.f32.mrf.mxu0
  %v3244 = vadd.f32 0.0, %v3243
  %v3245 = vpop.f32.mrf.mxu0
  %3246 = vmatprep.mubr.f32.mxu0 0.0
  %3247 = vmatmul.mubr.f32.gmra.mxu0 %v2916
  %v3248 = vpop.f32.mrf.mxu0
  %v3249 = vadd.f32 0.0, %v3248
  %v3250 = vpop.f32.mrf.mxu0
  %3251 = vmatprep.mubr.f32.mxu0 0.0
  %3252 = vmatmul.mubr.f32.gmra.mxu0 %v2919
  %v3253 = vpop.f32.mrf.mxu0
  %v3254 = vadd.f32 0.0, %v3253
  %v3255 = vpop.f32.mrf.mxu0
  %3256 = vmatprep.mubr.f32.mxu0 0.0
  %3257 = vmatmul.mubr.f32.gmra.mxu0 %v2922
  %v3258 = vpop.f32.mrf.mxu0
  %v3259 = vadd.f32 0.0, %v3258
  %v3260 = vpop.f32.mrf.mxu0
  %3261 = vmatprep.mubr.f32.mxu0 0.0
  %3262 = vmatmul.mubr.f32.gmra.mxu0 %v2925
  %v3263 = vpop.f32.mrf.mxu0
  %v3264 = vadd.f32 0.0, %v3263
  %v3265 = vpop.f32.mrf.mxu0
  %3266 = vmatprep.mubr.f32.mxu0 0.0
  %3267 = vmatmul.mubr.f32.gmra.mxu0 %v2928
  %v3268 = vpop.f32.mrf.mxu0
  %v3269 = vadd.f32 0.0, %v3268
  %v3270 = vpop.f32.mrf.mxu0
  %3271 = vmatprep.mubr.f32.mxu0 0.0
  %3272 = vmatmul.mubr.f32.gmra.mxu0 %v2931
  %v3273 = vpop.f32.mrf.mxu0
  %v3274 = vadd.f32 0.0, %v3273
  %v3275 = vpop.f32.mrf.mxu0
  %3276 = vmatprep.mubr.f32.mxu0 0.0
  %3277 = vmatmul.mubr.f32.gmra.mxu0 %v2934
  %v3278 = vpop.f32.mrf.mxu0
  %v3279 = vadd.f32 0.0, %v3278
  %v3280 = vpop.f32.mrf.mxu0
  %3281 = vmatprep.mubr.f32.mxu0 0.0
  %3282 = vmatmul.mubr.f32.gmra.mxu0 %v2937
  %v3283 = vpop.f32.mrf.mxu0
  %v3284 = vadd.f32 0.0, %v3283
  %v3285 = vpop.f32.mrf.mxu0
  %3286 = vmatprep.mubr.f32.mxu0 0.0
  %3287 = vmatmul.mubr.f32.gmra.mxu0 %v2940
  %v3288 = vpop.f32.mrf.mxu0
  %v3289 = vadd.f32 0.0, %v3288
  %v3290 = vpop.f32.mrf.mxu0
  %3291 = vmatprep.mubr.f32.mxu0 0.0
  %3292 = vmatmul.mubr.f32.gmra.mxu0 %v2943
  %v3293 = vpop.f32.mrf.mxu0
  %v3294 = vadd.f32 0.0, %v3293
  %v3295 = vpop.f32.mrf.mxu0
  %3296 = vmatprep.mubr.f32.mxu0 0.0
  %3297 = vmatmul.mubr.f32.gmra.mxu0 %v2946
  %v3298 = vpop.f32.mrf.mxu0
  %v3299 = vadd.f32 0.0, %v3298
  %v3300 = vpop.f32.mrf.mxu0
  %3301 = vmatprep.mubr.f32.mxu0 0.0
  %3302 = vmatmul.mubr.f32.gmra.mxu0 %v2949
  %v3303 = vpop.f32.mrf.mxu0
  %v3304 = vadd.f32 0.0, %v3303
  %v3305 = vpop.f32.mrf.mxu0
  %3306 = vmatprep.mubr.f32.mxu0 0.0
  %3307 = vmatmul.mubr.f32.gmra.mxu0 %v2952
  %v3308 = vpop.f32.mrf.mxu0
  %v3309 = vadd.f32 0.0, %v3308
  %v3310 = vpop.f32.mrf.mxu0
  %3311 = vmatprep.mubr.f32.mxu0 0.0
  %3312 = vmatmul.mubr.f32.gmra.mxu0 %v2955
  %v3313 = vpop.f32.mrf.mxu0
  %v3314 = vadd.f32 0.0, %v3313
  %v3315 = vpop.f32.mrf.mxu0
  %3316 = vmatprep.mubr.f32.mxu0 0.0
  %3317 = vmatmul.mubr.f32.gmra.mxu0 %v2958
  %v3318 = vpop.f32.mrf.mxu0
  %v3319 = vadd.f32 0.0, %v3318
  %v3320 = vpop.f32.mrf.mxu0
  %3321 = vmatprep.mubr.f32.mxu0 0.0
  %3322 = vmatmul.mubr.f32.gmra.mxu0 %v2961
  %v3323 = vpop.f32.mrf.mxu0
  %v3324 = vadd.f32 0.0, %v3323
  %v3325 = vpop.f32.mrf.mxu0
  %3326 = vmatprep.mubr.f32.mxu0 0.0
  %3327 = vmatmul.mubr.f32.gmra.mxu0 %v2964
  %v3328 = vpop.f32.mrf.mxu0
  %v3329 = vadd.f32 0.0, %v3328
  %v3330 = vpop.f32.mrf.mxu0
  %3331 = vmatprep.mubr.f32.mxu0 0.0
  %3332 = vmatmul.mubr.f32.gmra.mxu0 %v2967
  %v3333 = vpop.f32.mrf.mxu0
  %v3334 = vadd.f32 0.0, %v3333
  %v3335 = vpop.f32.mrf.mxu0
  %3336 = vmatprep.mubr.f32.mxu0 0.0
  %3337 = vmatmul.mubr.f32.gmra.mxu0 %v2970
  %v3338 = vpop.f32.mrf.mxu0
  %v3339 = vadd.f32 0.0, %v3338
  %v3340 = vpop.f32.mrf.mxu0
  %3341 = vmatprep.mubr.f32.mxu0 0.0
  %3342 = vmatmul.mubr.f32.gmra.mxu0 %v2973
  %v3343 = vpop.f32.mrf.mxu0
  %v3344 = vadd.f32 0.0, %v3343
  %v3345 = vpop.f32.mrf.mxu0
  %3346 = vmatprep.mubr.f32.mxu0 0.0
  %3347 = vmatmul.mubr.f32.gmra.mxu0 %v2976
  %v3348 = vpop.f32.mrf.mxu0
  %v3349 = vadd.f32 0.0, %v3348
  %v3350 = vpop.f32.mrf.mxu0
  %3351 = vmatprep.mubr.f32.mxu0 0.0
  %3352 = vmatmul.mubr.f32.gmra.mxu0 %v2979
  %v3353 = vpop.f32.mrf.mxu0
  %v3354 = vadd.f32 0.0, %v3353
  %v3355 = vpop.f32.mrf.mxu0
  %3356 = vmatprep.mubr.f32.mxu0 0.0
  %3357 = vmatmul.mubr.f32.gmra.mxu0 %v2982
  %v3358 = vpop.f32.mrf.mxu0
  %v3359 = vadd.f32 0.0, %v3358
  %v3360 = vpop.f32.mrf.mxu0
  %3361 = vmatprep.mubr.f32.mxu0 0.0
  %3362 = vmatmul.mubr.f32.gmra.mxu0 %v2985
  %v3363 = vpop.f32.mrf.mxu0
  %v3364 = vadd.f32 0.0, %v3363
  %v3365 = vpop.f32.mrf.mxu0
  %3366 = vmatprep.mubr.f32.mxu0 0.0
  %3367 = vmatmul.mubr.f32.gmra.mxu0 %v2988
  %v3368 = vpop.f32.mrf.mxu0
  %v3369 = vadd.f32 0.0, %v3368
  %v3370 = vpop.f32.mrf.mxu0
  %3371 = vmatprep.mubr.f32.mxu0 0.0
  %3372 = vmatmul.mubr.f32.gmra.mxu0 %v2991
  %v3373 = vpop.f32.mrf.mxu0
  %v3374 = vadd.f32 0.0, %v3373
  %v3375 = vpop.f32.mrf.mxu0
  %3376 = vmatprep.mubr.f32.mxu0 0.0
  %3377 = vmatmul.mubr.f32.gmra.mxu0 %v2994
  %v3378 = vpop.f32.mrf.mxu0
  %v3379 = vadd.f32 0.0, %v3378
  %v3380 = vpop.f32.mrf.mxu0
  %3381 = vmatprep.mubr.f32.mxu0 0.0
  %3382 = vmatmul.mubr.f32.gmra.mxu0 %v2997
  %v3383 = vpop.f32.mrf.mxu0
  %v3384 = vadd.f32 0.0, %v3383
  %v3385 = vpop.f32.mrf.mxu0
  %3386 = vdwg.mxu0
  %v3387 = vadd.f32 %v2677, %v3069
  %v3388 = vadd.f32 %v2678, %v3074
  %v3389 = vadd.f32 %v2679, %v3079
  %v3390 = vadd.f32 %v2680, %v3084
  %v3391 = vadd.f32 %v2681, %v3089
  %v3392 = vadd.f32 %v2682, %v3094
  %v3393 = vadd.f32 %v2683, %v3099
  %v3394 = vadd.f32 %v2684, %v3104
  %v3395 = vadd.f32 %v2685, %v3109
  %v3396 = vadd.f32 %v2686, %v3114
  %v3397 = vadd.f32 %v2687, %v3119
  %v3398 = vadd.f32 %v2688, %v3124
  %v3399 = vadd.f32 %v2689, %v3129
  %v3400 = vadd.f32 %v2690, %v3134
  %v3401 = vadd.f32 %v2691, %v3139
  %v3402 = vadd.f32 %v2692, %v3144
  %v3403 = vadd.f32 %v2693, %v3149
  %v3404 = vadd.f32 %v2694, %v3154
  %v3405 = vadd.f32 %v2695, %v3159
  %v3406 = vadd.f32 %v2696, %v3164
  %v3407 = vadd.f32 %v2697, %v3169
  %v3408 = vadd.f32 %v2698, %v3174
  %v3409 = vadd.f32 %v2699, %v3179
  %v3410 = vadd.f32 %v2700, %v3184
  %v3411 = vadd.f32 %v2701, %v3189
  %v3412 = vadd.f32 %v2702, %v3194
  %v3413 = vadd.f32 %v2703, %v3199
  %v3414 = vadd.f32 %v2704, %v3204
  %v3415 = vadd.f32 %v2705, %v3209
  %v3416 = vadd.f32 %v2706, %v3214
  %v3417 = vadd.f32 %v2707, %v3219
  %v3418 = vadd.f32 %v2708, %v3224
  %v3419 = vadd.f32 %v2709, %v3229
  %v3420 = vadd.f32 %v2710, %v3234
  %v3421 = vadd.f32 %v2711, %v3239
  %v3422 = vadd.f32 %v2712, %v3244
  %v3423 = vadd.f32 %v2713, %v3249
  %v3424 = vadd.f32 %v2714, %v3254
  %v3425 = vadd.f32 %v2715, %v3259
  %v3426 = vadd.f32 %v2716, %v3264
  %v3427 = vadd.f32 %v2717, %v3269
  %v3428 = vadd.f32 %v2718, %v3274
  %v3429 = vadd.f32 %v2719, %v3279
  %v3430 = vadd.f32 %v2720, %v3284
  %v3431 = vadd.f32 %v2721, %v3289
  %v3432 = vadd.f32 %v2722, %v3294
  %v3433 = vadd.f32 %v2723, %v3299
  %v3434 = vadd.f32 %v2724, %v3304
  %v3435 = vadd.f32 %v2725, %v3309
  %v3436 = vadd.f32 %v2726, %v3314
  %v3437 = vadd.f32 %v2727, %v3319
  %v3438 = vadd.f32 %v2728, %v3324
  %v3439 = vadd.f32 %v2729, %v3329
  %v3440 = vadd.f32 %v2730, %v3334
  %v3441 = vadd.f32 %v2731, %v3339
  %v3442 = vadd.f32 %v2732, %v3344
  %v3443 = vadd.f32 %v2733, %v3349
  %v3444 = vadd.f32 %v2734, %v3354
  %v3445 = vadd.f32 %v2735, %v3359
  %v3446 = vadd.f32 %v2736, %v3364
  %v3447 = vadd.f32 %v2737, %v3369
  %v3448 = vadd.f32 %v2738, %v3374
  %v3449 = vadd.f32 %v2739, %v3379
  %v3450 = vadd.f32 %v2740, %v3384
  %v3451 = vld [vmem:[%s2030 + $0x2] sm:$0xff]
  %v3452 = vld [vmem:[%s2030 + $0xa] sm:$0xff]
  %v3453 = vld [vmem:[%s2030 + $0x1a] sm:$0xff]
  %v3454 = vld [vmem:[%s2030 + $0x22] sm:$0xff]
  %v3455 = vld [vmem:[%s2030 + $0x32] sm:$0xff]
  %v3456 = vld [vmem:[%s2030 + $0x3a] sm:$0xff]
  %v3457 = vld [vmem:[%s2030 + $0x4a] sm:$0xff]
  %v3458 = vld [vmem:[%s2030 + $0x52] sm:$0xff]
  %v3459 = vld [vmem:[%s2030 + $0x62] sm:$0xff]
  %v3460 = vld [vmem:[%s2030 + $0x6a] sm:$0xff]
  %v3461 = vld [vmem:[%s2030 + $0x7a] sm:$0xff]
  %v3462 = vld [vmem:[%s2030 + $0x82] sm:$0xff]
  %v3463 = vld [vmem:[%s2030 + $0x92] sm:$0xff]
  %v3464 = vld [vmem:[%s2030 + $0x9a] sm:$0xff]
  %v3465 = vld [vmem:[%s2030 + $0xaa] sm:$0xff]
  %v3466 = vld [vmem:[%s2030 + $0xb2] sm:$0xff]
  %v3467 = vld [vmem:[%s2030 + $0xc2] sm:$0xff]
  %v3468 = vld [vmem:[%s2030 + $0xca] sm:$0xff]
  %v3469 = vld [vmem:[%s2030 + $0xda] sm:$0xff]
  %v3470 = vld [vmem:[%s2030 + $0xe2] sm:$0xff]
  %v3471 = vld [vmem:[%s2030 + $0xf2] sm:$0xff]
  %v3472 = vld [vmem:[%s2030 + $0xfa] sm:$0xff]
  %v3473 = vld [vmem:[%s2030 + $0x10a] sm:$0xff]
  %v3474 = vld [vmem:[%s2030 + $0x112] sm:$0xff]
  %v3475 = vld [vmem:[%s2030 + $0x122] sm:$0xff]
  %v3476 = vld [vmem:[%s2030 + $0x12a] sm:$0xff]
  %v3477 = vld [vmem:[%s2030 + $0x13a] sm:$0xff]
  %v3478 = vld [vmem:[%s2030 + $0x142] sm:$0xff]
  %v3479 = vld [vmem:[%s2030 + $0x152] sm:$0xff]
  %v3480 = vld [vmem:[%s2030 + $0x15a] sm:$0xff]
  %v3481 = vld [vmem:[%s2030 + $0x16a] sm:$0xff]
  %v3482 = vld [vmem:[%s2030 + $0x172] sm:$0xff]
  %v3483 = vld [vmem:[%s2030 + $0x1b2] sm:$0xff]
  %v3484 = vld [vmem:[%s2030 + $0x1ba] sm:$0xff]
  %v3485 = vld [vmem:[%s2030 + $0x1ca] sm:$0xff]
  %v3486 = vld [vmem:[%s2030 + $0x1d2] sm:$0xff]
  %v3487 = vld [vmem:[%s2030 + $0x1e2] sm:$0xff]
  %v3488 = vld [vmem:[%s2030 + $0x1ea] sm:$0xff]
  %v3489 = vld [vmem:[%s2030 + $0x1fa] sm:$0xff]
  %v3490 = vld [vmem:[%s2030 + $0x202] sm:$0xff]
  %v3491 = vld [vmem:[%s2030 + $0x212] sm:$0xff]
  %v3492 = vld [vmem:[%s2030 + $0x21a] sm:$0xff]
  %v3493 = vld [vmem:[%s2030 + $0x22a] sm:$0xff]
  %v3494 = vld [vmem:[%s2030 + $0x232] sm:$0xff]
  %v3495 = vld [vmem:[%s2030 + $0x242] sm:$0xff]
  %v3496 = vld [vmem:[%s2030 + $0x24a] sm:$0xff]
  %v3497 = vld [vmem:[%s2030 + $0x25a] sm:$0xff]
  %v3498 = vld [vmem:[%s2030 + $0x262] sm:$0xff]
  %v3499 = vld [vmem:[%s2030 + $0x272] sm:$0xff]
  %v3500 = vld [vmem:[%s2030 + $0x27a] sm:$0xff]
  %v3501 = vld [vmem:[%s2030 + $0x28a] sm:$0xff]
  %v3502 = vld [vmem:[%s2030 + $0x292] sm:$0xff]
  %v3503 = vld [vmem:[%s2030 + $0x2a2] sm:$0xff]
  %v3504 = vld [vmem:[%s2030 + $0x2aa] sm:$0xff]
  %v3505 = vld [vmem:[%s2030 + $0x2ba] sm:$0xff]
  %v3506 = vld [vmem:[%s2030 + $0x2c2] sm:$0xff]
  %v3507 = vld [vmem:[%s2030 + $0x2d2] sm:$0xff]
  %v3508 = vld [vmem:[%s2030 + $0x2da] sm:$0xff]
  %v3509 = vld [vmem:[%s2030 + $0x2ea] sm:$0xff]
  %v3510 = vld [vmem:[%s2030 + $0x2f2] sm:$0xff]
  %v3511 = vld [vmem:[%s2030 + $0x302] sm:$0xff]
  %v3512 = vld [vmem:[%s2030 + $0x30a] sm:$0xff]
  %v3513 = vld [vmem:[%s2030 + $0x31a] sm:$0xff]
  %v3514 = vld [vmem:[%s2030 + $0x322] sm:$0xff]
  %s3515 = scalar_lea.vmem %s1, 20
  %v3516 = vld [vmem:[%s3515] sm:$0xf]
  %v3518 = vsel %vm158, %v3451, 0
  %v3521 = vsel %vm158, %v3452, 0
  %v3524 = vsel %vm158, %v3453, 0
  %v3527 = vsel %vm158, %v3454, 0
  %v3530 = vsel %vm158, %v3455, 0
  %v3533 = vsel %vm158, %v3456, 0
  %v3536 = vsel %vm158, %v3457, 0
  %v3539 = vsel %vm158, %v3458, 0
  %v3542 = vsel %vm158, %v3459, 0
  %v3545 = vsel %vm158, %v3460, 0
  %v3548 = vsel %vm158, %v3461, 0
  %v3551 = vsel %vm158, %v3462, 0
  %v3554 = vsel %vm158, %v3463, 0
  %v3557 = vsel %vm158, %v3464, 0
  %v3560 = vsel %vm158, %v3465, 0
  %v3563 = vsel %vm158, %v3466, 0
  %v3566 = vsel %vm158, %v3467, 0
  %v3569 = vsel %vm158, %v3468, 0
  %v3572 = vsel %vm158, %v3469, 0
  %v3575 = vsel %vm158, %v3470, 0
  %v3578 = vsel %vm158, %v3471, 0
  %v3581 = vsel %vm158, %v3472, 0
  %v3584 = vsel %vm158, %v3473, 0
  %v3587 = vsel %vm158, %v3474, 0
  %v3590 = vsel %vm158, %v3475, 0
  %v3593 = vsel %vm158, %v3476, 0
  %v3596 = vsel %vm158, %v3477, 0
  %v3599 = vsel %vm158, %v3478, 0
  %v3602 = vsel %vm158, %v3479, 0
  %v3605 = vsel %vm158, %v3480, 0
  %v3608 = vsel %vm158, %v3481, 0
  %v3611 = vsel %vm158, %v3482, 0
  %v3614 = vsel %vm158, %v3483, 0
  %v3617 = vsel %vm158, %v3484, 0
  %v3620 = vsel %vm158, %v3485, 0
  %v3623 = vsel %vm158, %v3486, 0
  %v3626 = vsel %vm158, %v3487, 0
  %v3629 = vsel %vm158, %v3488, 0
  %v3632 = vsel %vm158, %v3489, 0
  %v3635 = vsel %vm158, %v3490, 0
  %v3638 = vsel %vm158, %v3491, 0
  %v3641 = vsel %vm158, %v3492, 0
  %v3644 = vsel %vm158, %v3493, 0
  %v3647 = vsel %vm158, %v3494, 0
  %v3650 = vsel %vm158, %v3495, 0
  %v3653 = vsel %vm158, %v3496, 0
  %v3656 = vsel %vm158, %v3497, 0
  %v3659 = vsel %vm158, %v3498, 0
  %v3662 = vsel %vm158, %v3499, 0
  %v3665 = vsel %vm158, %v3500, 0
  %v3668 = vsel %vm158, %v3501, 0
  %v3671 = vsel %vm158, %v3502, 0
  %v3674 = vsel %vm158, %v3503, 0
  %v3677 = vsel %vm158, %v3504, 0
  %v3680 = vsel %vm158, %v3505, 0
  %v3683 = vsel %vm158, %v3506, 0
  %v3686 = vsel %vm158, %v3507, 0
  %v3689 = vsel %vm158, %v3508, 0
  %v3692 = vsel %vm158, %v3509, 0
  %v3695 = vsel %vm158, %v3510, 0
  %v3698 = vsel %vm158, %v3511, 0
  %v3701 = vsel %vm158, %v3512, 0
  %v3704 = vsel %vm158, %v3513, 0
  %v3707 = vsel %vm158, %v3514, 0
  %v3710 = vsel %vm351, %v3516, 0
  %3712 = vmatprep.subr.mxu0 0.0
  %3713 = vmatpush1.msra.mxu0 0.0
  %3714 = vmatprep.subr.mxu0 0.0
  %3715 = vmatpush1.msra.mxu0 0.0
  %3716 = vmatprep.subr.mxu0 0.0
  %3717 = vmatpush1.msra.mxu0 0.0
  %3718 = vmatprep.subr.mxu0 0.0
  %3719 = vmatpush1.msra.mxu0 0.0
  %3720 = vmatprep.subr.mxu0 0.0
  %3721 = vmatpush1.msra.mxu0 0.0
  %3722 = vmatprep.subr.mxu0 0.0
  %3723 = vmatpush1.msra.mxu0 0.0
  %3724 = vmatprep.subr.mxu0 0.0
  %3725 = vmatpush1.msra.mxu0 0.0
  %3726 = vmatprep.subr.mxu0 0.0
  %3727 = vmatpush1.msra.mxu0 0.0
  %3728 = vmatprep.subr.mxu0 0.0
  %3729 = vmatpush1.msra.mxu0 0.0
  %3730 = vmatprep.subr.mxu0 0.0
  %3731 = vmatpush1.msra.mxu0 0.0
  %3732 = vmatprep.subr.mxu0 0.0
  %3733 = vmatpush1.msra.mxu0 0.0
  %3734 = vmatprep.subr.mxu0 0.0
  %3735 = vmatpush1.msra.mxu0 0.0
  %3736 = vmatprep.subr.mxu0 0.0
  %3737 = vmatpush1.msra.mxu0 0.0
  %3738 = vmatprep.subr.mxu0 0.0
  %3739 = vmatpush1.msra.mxu0 0.0
  %3740 = vmatprep.subr.mxu0 0.0
  %3741 = vmatpush1.msra.mxu0 0.0
  %3742 = vmatprep.subr.mxu0 0.0
  %3743 = vmatpush1.msra.mxu0 %v3710
  %3744 = vmatprep.subr.mxu0 0.0
  %3745 = vmatpush2.msra.mxu0 0.0
  %3746 = vmatprep.subr.mxu0 0.0
  %3747 = vmatpush2.msra.mxu0 0.0
  %3748 = vmatprep.subr.mxu0 0.0
  %3749 = vmatpush2.msra.mxu0 0.0
  %3750 = vmatprep.subr.mxu0 0.0
  %3751 = vmatpush2.msra.mxu0 0.0
  %3752 = vmatprep.subr.mxu0 0.0
  %3753 = vmatpush2.msra.mxu0 0.0
  %3754 = vmatprep.subr.mxu0 0.0
  %3755 = vmatpush2.msra.mxu0 0.0
  %3756 = vmatprep.subr.mxu0 0.0
  %3757 = vmatpush2.msra.mxu0 0.0
  %3758 = vmatprep.subr.mxu0 0.0
  %3759 = vmatpush2.msra.mxu0 0.0
  %3760 = vmatprep.subr.mxu0 0.0
  %3761 = vmatpush2.msra.mxu0 0.0
  %3762 = vmatprep.subr.mxu0 0.0
  %3763 = vmatpush2.msra.mxu0 0.0
  %3764 = vmatprep.subr.mxu0 0.0
  %3765 = vmatpush2.msra.mxu0 0.0
  %3766 = vmatprep.subr.mxu0 0.0
  %3767 = vmatpush2.msra.mxu0 0.0
  %3768 = vmatprep.subr.mxu0 0.0
  %3769 = vmatpush2.msra.mxu0 0.0
  %3770 = vmatprep.subr.mxu0 0.0
  %3771 = vmatpush2.msra.mxu0 0.0
  %3772 = vmatprep.subr.mxu0 0.0
  %3773 = vmatpush2.msra.mxu0 0.0
  %3774 = vmatprep.subr.mxu0 0.0
  %3775 = vmatpush2.msra.mxu0 0.0
  %3776 = vmatprep.mubr.f32.mxu0 0.0
  %3777 = vmatmul.mubr.f32.gmra.mxu0 %v3518
  %v3778 = vpop.f32.mrf.mxu0
  %v3779 = vadd.f32 0.0, %v3778
  %v3780 = vpop.f32.mrf.mxu0
  %3781 = vmatprep.mubr.f32.mxu0 0.0
  %3782 = vmatmul.mubr.f32.gmra.mxu0 %v3521
  %v3783 = vpop.f32.mrf.mxu0
  %v3784 = vadd.f32 0.0, %v3783
  %v3785 = vpop.f32.mrf.mxu0
  %3786 = vmatprep.mubr.f32.mxu0 0.0
  %3787 = vmatmul.mubr.f32.gmra.mxu0 %v3524
  %v3788 = vpop.f32.mrf.mxu0
  %v3789 = vadd.f32 0.0, %v3788
  %v3790 = vpop.f32.mrf.mxu0
  %3791 = vmatprep.mubr.f32.mxu0 0.0
  %3792 = vmatmul.mubr.f32.gmra.mxu0 %v3527
  %v3793 = vpop.f32.mrf.mxu0
  %v3794 = vadd.f32 0.0, %v3793
  %v3795 = vpop.f32.mrf.mxu0
  %3796 = vmatprep.mubr.f32.mxu0 0.0
  %3797 = vmatmul.mubr.f32.gmra.mxu0 %v3530
  %v3798 = vpop.f32.mrf.mxu0
  %v3799 = vadd.f32 0.0, %v3798
  %v3800 = vpop.f32.mrf.mxu0
  %3801 = vmatprep.mubr.f32.mxu0 0.0
  %3802 = vmatmul.mubr.f32.gmra.mxu0 %v3533
  %v3803 = vpop.f32.mrf.mxu0
  %v3804 = vadd.f32 0.0, %v3803
  %v3805 = vpop.f32.mrf.mxu0
  %3806 = vmatprep.mubr.f32.mxu0 0.0
  %3807 = vmatmul.mubr.f32.gmra.mxu0 %v3536
  %v3808 = vpop.f32.mrf.mxu0
  %v3809 = vadd.f32 0.0, %v3808
  %v3810 = vpop.f32.mrf.mxu0
  %3811 = vmatprep.mubr.f32.mxu0 0.0
  %3812 = vmatmul.mubr.f32.gmra.mxu0 %v3539
  %v3813 = vpop.f32.mrf.mxu0
  %v3814 = vadd.f32 0.0, %v3813
  %v3815 = vpop.f32.mrf.mxu0
  %3816 = vmatprep.mubr.f32.mxu0 0.0
  %3817 = vmatmul.mubr.f32.gmra.mxu0 %v3542
  %v3818 = vpop.f32.mrf.mxu0
  %v3819 = vadd.f32 0.0, %v3818
  %v3820 = vpop.f32.mrf.mxu0
  %3821 = vmatprep.mubr.f32.mxu0 0.0
  %3822 = vmatmul.mubr.f32.gmra.mxu0 %v3545
  %v3823 = vpop.f32.mrf.mxu0
  %v3824 = vadd.f32 0.0, %v3823
  %v3825 = vpop.f32.mrf.mxu0
  %3826 = vmatprep.mubr.f32.mxu0 0.0
  %3827 = vmatmul.mubr.f32.gmra.mxu0 %v3548
  %v3828 = vpop.f32.mrf.mxu0
  %v3829 = vadd.f32 0.0, %v3828
  %v3830 = vpop.f32.mrf.mxu0
  %3831 = vmatprep.mubr.f32.mxu0 0.0
  %3832 = vmatmul.mubr.f32.gmra.mxu0 %v3551
  %v3833 = vpop.f32.mrf.mxu0
  %v3834 = vadd.f32 0.0, %v3833
  %v3835 = vpop.f32.mrf.mxu0
  %3836 = vmatprep.mubr.f32.mxu0 0.0
  %3837 = vmatmul.mubr.f32.gmra.mxu0 %v3554
  %v3838 = vpop.f32.mrf.mxu0
  %v3839 = vadd.f32 0.0, %v3838
  %v3840 = vpop.f32.mrf.mxu0
  %3841 = vmatprep.mubr.f32.mxu0 0.0
  %3842 = vmatmul.mubr.f32.gmra.mxu0 %v3557
  %v3843 = vpop.f32.mrf.mxu0
  %v3844 = vadd.f32 0.0, %v3843
  %v3845 = vpop.f32.mrf.mxu0
  %3846 = vmatprep.mubr.f32.mxu0 0.0
  %3847 = vmatmul.mubr.f32.gmra.mxu0 %v3560
  %v3848 = vpop.f32.mrf.mxu0
  %v3849 = vadd.f32 0.0, %v3848
  %v3850 = vpop.f32.mrf.mxu0
  %3851 = vmatprep.mubr.f32.mxu0 0.0
  %3852 = vmatmul.mubr.f32.gmra.mxu0 %v3563
  %v3853 = vpop.f32.mrf.mxu0
  %v3854 = vadd.f32 0.0, %v3853
  %v3855 = vpop.f32.mrf.mxu0
  %3856 = vmatprep.mubr.f32.mxu0 0.0
  %3857 = vmatmul.mubr.f32.gmra.mxu0 %v3566
  %v3858 = vpop.f32.mrf.mxu0
  %v3859 = vadd.f32 0.0, %v3858
  %v3860 = vpop.f32.mrf.mxu0
  %3861 = vmatprep.mubr.f32.mxu0 0.0
  %3862 = vmatmul.mubr.f32.gmra.mxu0 %v3569
  %v3863 = vpop.f32.mrf.mxu0
  %v3864 = vadd.f32 0.0, %v3863
  %v3865 = vpop.f32.mrf.mxu0
  %3866 = vmatprep.mubr.f32.mxu0 0.0
  %3867 = vmatmul.mubr.f32.gmra.mxu0 %v3572
  %v3868 = vpop.f32.mrf.mxu0
  %v3869 = vadd.f32 0.0, %v3868
  %v3870 = vpop.f32.mrf.mxu0
  %3871 = vmatprep.mubr.f32.mxu0 0.0
  %3872 = vmatmul.mubr.f32.gmra.mxu0 %v3575
  %v3873 = vpop.f32.mrf.mxu0
  %v3874 = vadd.f32 0.0, %v3873
  %v3875 = vpop.f32.mrf.mxu0
  %3876 = vmatprep.mubr.f32.mxu0 0.0
  %3877 = vmatmul.mubr.f32.gmra.mxu0 %v3578
  %v3878 = vpop.f32.mrf.mxu0
  %v3879 = vadd.f32 0.0, %v3878
  %v3880 = vpop.f32.mrf.mxu0
  %3881 = vmatprep.mubr.f32.mxu0 0.0
  %3882 = vmatmul.mubr.f32.gmra.mxu0 %v3581
  %v3883 = vpop.f32.mrf.mxu0
  %v3884 = vadd.f32 0.0, %v3883
  %v3885 = vpop.f32.mrf.mxu0
  %3886 = vmatprep.mubr.f32.mxu0 0.0
  %3887 = vmatmul.mubr.f32.gmra.mxu0 %v3584
  %v3888 = vpop.f32.mrf.mxu0
  %v3889 = vadd.f32 0.0, %v3888
  %v3890 = vpop.f32.mrf.mxu0
  %3891 = vmatprep.mubr.f32.mxu0 0.0
  %3892 = vmatmul.mubr.f32.gmra.mxu0 %v3587
  %v3893 = vpop.f32.mrf.mxu0
  %v3894 = vadd.f32 0.0, %v3893
  %v3895 = vpop.f32.mrf.mxu0
  %3896 = vmatprep.mubr.f32.mxu0 0.0
  %3897 = vmatmul.mubr.f32.gmra.mxu0 %v3590
  %v3898 = vpop.f32.mrf.mxu0
  %v3899 = vadd.f32 0.0, %v3898
  %v3900 = vpop.f32.mrf.mxu0
  %3901 = vmatprep.mubr.f32.mxu0 0.0
  %3902 = vmatmul.mubr.f32.gmra.mxu0 %v3593
  %v3903 = vpop.f32.mrf.mxu0
  %v3904 = vadd.f32 0.0, %v3903
  %v3905 = vpop.f32.mrf.mxu0
  %3906 = vmatprep.mubr.f32.mxu0 0.0
  %3907 = vmatmul.mubr.f32.gmra.mxu0 %v3596
  %v3908 = vpop.f32.mrf.mxu0
  %v3909 = vadd.f32 0.0, %v3908
  %v3910 = vpop.f32.mrf.mxu0
  %3911 = vmatprep.mubr.f32.mxu0 0.0
  %3912 = vmatmul.mubr.f32.gmra.mxu0 %v3599
  %v3913 = vpop.f32.mrf.mxu0
  %v3914 = vadd.f32 0.0, %v3913
  %v3915 = vpop.f32.mrf.mxu0
  %3916 = vmatprep.mubr.f32.mxu0 0.0
  %3917 = vmatmul.mubr.f32.gmra.mxu0 %v3602
  %v3918 = vpop.f32.mrf.mxu0
  %v3919 = vadd.f32 0.0, %v3918
  %v3920 = vpop.f32.mrf.mxu0
  %3921 = vmatprep.mubr.f32.mxu0 0.0
  %3922 = vmatmul.mubr.f32.gmra.mxu0 %v3605
  %v3923 = vpop.f32.mrf.mxu0
  %v3924 = vadd.f32 0.0, %v3923
  %v3925 = vpop.f32.mrf.mxu0
  %3926 = vmatprep.mubr.f32.mxu0 0.0
  %3927 = vmatmul.mubr.f32.gmra.mxu0 %v3608
  %v3928 = vpop.f32.mrf.mxu0
  %v3929 = vadd.f32 0.0, %v3928
  %v3930 = vpop.f32.mrf.mxu0
  %3931 = vmatprep.mubr.f32.mxu0 0.0
  %3932 = vmatmul.mubr.f32.gmra.mxu0 %v3611
  %v3933 = vpop.f32.mrf.mxu0
  %v3934 = vadd.f32 0.0, %v3933
  %v3935 = vpop.f32.mrf.mxu0
  %3936 = vmatprep.mubr.f32.mxu0 0.0
  %3937 = vmatmul.mubr.f32.gmra.mxu0 %v3614
  %v3938 = vpop.f32.mrf.mxu0
  %v3939 = vadd.f32 0.0, %v3938
  %v3940 = vpop.f32.mrf.mxu0
  %3941 = vmatprep.mubr.f32.mxu0 0.0
  %3942 = vmatmul.mubr.f32.gmra.mxu0 %v3617
  %v3943 = vpop.f32.mrf.mxu0
  %v3944 = vadd.f32 0.0, %v3943
  %v3945 = vpop.f32.mrf.mxu0
  %3946 = vmatprep.mubr.f32.mxu0 0.0
  %3947 = vmatmul.mubr.f32.gmra.mxu0 %v3620
  %v3948 = vpop.f32.mrf.mxu0
  %v3949 = vadd.f32 0.0, %v3948
  %v3950 = vpop.f32.mrf.mxu0
  %3951 = vmatprep.mubr.f32.mxu0 0.0
  %3952 = vmatmul.mubr.f32.gmra.mxu0 %v3623
  %v3953 = vpop.f32.mrf.mxu0
  %v3954 = vadd.f32 0.0, %v3953
  %v3955 = vpop.f32.mrf.mxu0
  %3956 = vmatprep.mubr.f32.mxu0 0.0
  %3957 = vmatmul.mubr.f32.gmra.mxu0 %v3626
  %v3958 = vpop.f32.mrf.mxu0
  %v3959 = vadd.f32 0.0, %v3958
  %v3960 = vpop.f32.mrf.mxu0
  %3961 = vmatprep.mubr.f32.mxu0 0.0
  %3962 = vmatmul.mubr.f32.gmra.mxu0 %v3629
  %v3963 = vpop.f32.mrf.mxu0
  %v3964 = vadd.f32 0.0, %v3963
  %v3965 = vpop.f32.mrf.mxu0
  %3966 = vmatprep.mubr.f32.mxu0 0.0
  %3967 = vmatmul.mubr.f32.gmra.mxu0 %v3632
  %v3968 = vpop.f32.mrf.mxu0
  %v3969 = vadd.f32 0.0, %v3968
  %v3970 = vpop.f32.mrf.mxu0
  %3971 = vmatprep.mubr.f32.mxu0 0.0
  %3972 = vmatmul.mubr.f32.gmra.mxu0 %v3635
  %v3973 = vpop.f32.mrf.mxu0
  %v3974 = vadd.f32 0.0, %v3973
  %v3975 = vpop.f32.mrf.mxu0
  %3976 = vmatprep.mubr.f32.mxu0 0.0
  %3977 = vmatmul.mubr.f32.gmra.mxu0 %v3638
  %v3978 = vpop.f32.mrf.mxu0
  %v3979 = vadd.f32 0.0, %v3978
  %v3980 = vpop.f32.mrf.mxu0
  %3981 = vmatprep.mubr.f32.mxu0 0.0
  %3982 = vmatmul.mubr.f32.gmra.mxu0 %v3641
  %v3983 = vpop.f32.mrf.mxu0
  %v3984 = vadd.f32 0.0, %v3983
  %v3985 = vpop.f32.mrf.mxu0
  %3986 = vmatprep.mubr.f32.mxu0 0.0
  %3987 = vmatmul.mubr.f32.gmra.mxu0 %v3644
  %v3988 = vpop.f32.mrf.mxu0
  %v3989 = vadd.f32 0.0, %v3988
  %v3990 = vpop.f32.mrf.mxu0
  %3991 = vmatprep.mubr.f32.mxu0 0.0
  %3992 = vmatmul.mubr.f32.gmra.mxu0 %v3647
  %v3993 = vpop.f32.mrf.mxu0
  %v3994 = vadd.f32 0.0, %v3993
  %v3995 = vpop.f32.mrf.mxu0
  %3996 = vmatprep.mubr.f32.mxu0 0.0
  %3997 = vmatmul.mubr.f32.gmra.mxu0 %v3650
  %v3998 = vpop.f32.mrf.mxu0
  %v3999 = vadd.f32 0.0, %v3998
  %v4000 = vpop.f32.mrf.mxu0
  %4001 = vmatprep.mubr.f32.mxu0 0.0
  %4002 = vmatmul.mubr.f32.gmra.mxu0 %v3653
  %v4003 = vpop.f32.mrf.mxu0
  %v4004 = vadd.f32 0.0, %v4003
  %v4005 = vpop.f32.mrf.mxu0
  %4006 = vmatprep.mubr.f32.mxu0 0.0
  %4007 = vmatmul.mubr.f32.gmra.mxu0 %v3656
  %v4008 = vpop.f32.mrf.mxu0
  %v4009 = vadd.f32 0.0, %v4008
  %v4010 = vpop.f32.mrf.mxu0
  %4011 = vmatprep.mubr.f32.mxu0 0.0
  %4012 = vmatmul.mubr.f32.gmra.mxu0 %v3659
  %v4013 = vpop.f32.mrf.mxu0
  %v4014 = vadd.f32 0.0, %v4013
  %v4015 = vpop.f32.mrf.mxu0
  %4016 = vmatprep.mubr.f32.mxu0 0.0
  %4017 = vmatmul.mubr.f32.gmra.mxu0 %v3662
  %v4018 = vpop.f32.mrf.mxu0
  %v4019 = vadd.f32 0.0, %v4018
  %v4020 = vpop.f32.mrf.mxu0
  %4021 = vmatprep.mubr.f32.mxu0 0.0
  %4022 = vmatmul.mubr.f32.gmra.mxu0 %v3665
  %v4023 = vpop.f32.mrf.mxu0
  %v4024 = vadd.f32 0.0, %v4023
  %v4025 = vpop.f32.mrf.mxu0
  %4026 = vmatprep.mubr.f32.mxu0 0.0
  %4027 = vmatmul.mubr.f32.gmra.mxu0 %v3668
  %v4028 = vpop.f32.mrf.mxu0
  %v4029 = vadd.f32 0.0, %v4028
  %v4030 = vpop.f32.mrf.mxu0
  %4031 = vmatprep.mubr.f32.mxu0 0.0
  %4032 = vmatmul.mubr.f32.gmra.mxu0 %v3671
  %v4033 = vpop.f32.mrf.mxu0
  %v4034 = vadd.f32 0.0, %v4033
  %v4035 = vpop.f32.mrf.mxu0
  %4036 = vmatprep.mubr.f32.mxu0 0.0
  %4037 = vmatmul.mubr.f32.gmra.mxu0 %v3674
  %v4038 = vpop.f32.mrf.mxu0
  %v4039 = vadd.f32 0.0, %v4038
  %v4040 = vpop.f32.mrf.mxu0
  %4041 = vmatprep.mubr.f32.mxu0 0.0
  %4042 = vmatmul.mubr.f32.gmra.mxu0 %v3677
  %v4043 = vpop.f32.mrf.mxu0
  %v4044 = vadd.f32 0.0, %v4043
  %v4045 = vpop.f32.mrf.mxu0
  %4046 = vmatprep.mubr.f32.mxu0 0.0
  %4047 = vmatmul.mubr.f32.gmra.mxu0 %v3680
  %v4048 = vpop.f32.mrf.mxu0
  %v4049 = vadd.f32 0.0, %v4048
  %v4050 = vpop.f32.mrf.mxu0
  %4051 = vmatprep.mubr.f32.mxu0 0.0
  %4052 = vmatmul.mubr.f32.gmra.mxu0 %v3683
  %v4053 = vpop.f32.mrf.mxu0
  %v4054 = vadd.f32 0.0, %v4053
  %v4055 = vpop.f32.mrf.mxu0
  %4056 = vmatprep.mubr.f32.mxu0 0.0
  %4057 = vmatmul.mubr.f32.gmra.mxu0 %v3686
  %v4058 = vpop.f32.mrf.mxu0
  %v4059 = vadd.f32 0.0, %v4058
  %v4060 = vpop.f32.mrf.mxu0
  %4061 = vmatprep.mubr.f32.mxu0 0.0
  %4062 = vmatmul.mubr.f32.gmra.mxu0 %v3689
  %v4063 = vpop.f32.mrf.mxu0
  %v4064 = vadd.f32 0.0, %v4063
  %v4065 = vpop.f32.mrf.mxu0
  %4066 = vmatprep.mubr.f32.mxu0 0.0
  %4067 = vmatmul.mubr.f32.gmra.mxu0 %v3692
  %v4068 = vpop.f32.mrf.mxu0
  %v4069 = vadd.f32 0.0, %v4068
  %v4070 = vpop.f32.mrf.mxu0
  %4071 = vmatprep.mubr.f32.mxu0 0.0
  %4072 = vmatmul.mubr.f32.gmra.mxu0 %v3695
  %v4073 = vpop.f32.mrf.mxu0
  %v4074 = vadd.f32 0.0, %v4073
  %v4075 = vpop.f32.mrf.mxu0
  %4076 = vmatprep.mubr.f32.mxu0 0.0
  %4077 = vmatmul.mubr.f32.gmra.mxu0 %v3698
  %v4078 = vpop.f32.mrf.mxu0
  %v4079 = vadd.f32 0.0, %v4078
  %v4080 = vpop.f32.mrf.mxu0
  %4081 = vmatprep.mubr.f32.mxu0 0.0
  %4082 = vmatmul.mubr.f32.gmra.mxu0 %v3701
  %v4083 = vpop.f32.mrf.mxu0
  %v4084 = vadd.f32 0.0, %v4083
  %v4085 = vpop.f32.mrf.mxu0
  %4086 = vmatprep.mubr.f32.mxu0 0.0
  %4087 = vmatmul.mubr.f32.gmra.mxu0 %v3704
  %v4088 = vpop.f32.mrf.mxu0
  %v4089 = vadd.f32 0.0, %v4088
  %v4090 = vpop.f32.mrf.mxu0
  %4091 = vmatprep.mubr.f32.mxu0 0.0
  %4092 = vmatmul.mubr.f32.gmra.mxu0 %v3707
  %v4093 = vpop.f32.mrf.mxu0
  %v4094 = vadd.f32 0.0, %v4093
  %v4095 = vpop.f32.mrf.mxu0
  %4096 = vdwg.mxu0
  %v4097 = vadd.f32 %v3387, %v3779
  %v4098 = vadd.f32 %v3388, %v3784
  %v4099 = vadd.f32 %v3389, %v3789
  %v4100 = vadd.f32 %v3390, %v3794
  %v4101 = vadd.f32 %v3391, %v3799
  %v4102 = vadd.f32 %v3392, %v3804
  %v4103 = vadd.f32 %v3393, %v3809
  %v4104 = vadd.f32 %v3394, %v3814
  %v4105 = vadd.f32 %v3395, %v3819
  %v4106 = vadd.f32 %v3396, %v3824
  %v4107 = vadd.f32 %v3397, %v3829
  %v4108 = vadd.f32 %v3398, %v3834
  %v4109 = vadd.f32 %v3399, %v3839
  %v4110 = vadd.f32 %v3400, %v3844
  %v4111 = vadd.f32 %v3401, %v3849
  %v4112 = vadd.f32 %v3402, %v3854
  %v4113 = vadd.f32 %v3403, %v3859
  %v4114 = vadd.f32 %v3404, %v3864
  %v4115 = vadd.f32 %v3405, %v3869
  %v4116 = vadd.f32 %v3406, %v3874
  %v4117 = vadd.f32 %v3407, %v3879
  %v4118 = vadd.f32 %v3408, %v3884
  %v4119 = vadd.f32 %v3409, %v3889
  %v4120 = vadd.f32 %v3410, %v3894
  %v4121 = vadd.f32 %v3411, %v3899
  %v4122 = vadd.f32 %v3412, %v3904
  %v4123 = vadd.f32 %v3413, %v3909
  %v4124 = vadd.f32 %v3414, %v3914
  %v4125 = vadd.f32 %v3415, %v3919
  %v4126 = vadd.f32 %v3416, %v3924
  %v4127 = vadd.f32 %v3417, %v3929
  %v4128 = vadd.f32 %v3418, %v3934
  %v4129 = vadd.f32 %v3419, %v3939
  %v4130 = vadd.f32 %v3420, %v3944
  %v4131 = vadd.f32 %v3421, %v3949
  %v4132 = vadd.f32 %v3422, %v3954
  %v4133 = vadd.f32 %v3423, %v3959
  %v4134 = vadd.f32 %v3424, %v3964
  %v4135 = vadd.f32 %v3425, %v3969
  %v4136 = vadd.f32 %v3426, %v3974
  %v4137 = vadd.f32 %v3427, %v3979
  %v4138 = vadd.f32 %v3428, %v3984
  %v4139 = vadd.f32 %v3429, %v3989
  %v4140 = vadd.f32 %v3430, %v3994
  %v4141 = vadd.f32 %v3431, %v3999
  %v4142 = vadd.f32 %v3432, %v4004
  %v4143 = vadd.f32 %v3433, %v4009
  %v4144 = vadd.f32 %v3434, %v4014
  %v4145 = vadd.f32 %v3435, %v4019
  %v4146 = vadd.f32 %v3436, %v4024
  %v4147 = vadd.f32 %v3437, %v4029
  %v4148 = vadd.f32 %v3438, %v4034
  %v4149 = vadd.f32 %v3439, %v4039
  %v4150 = vadd.f32 %v3440, %v4044
  %v4151 = vadd.f32 %v3441, %v4049
  %v4152 = vadd.f32 %v3442, %v4054
  %v4153 = vadd.f32 %v3443, %v4059
  %v4154 = vadd.f32 %v3444, %v4064
  %v4155 = vadd.f32 %v3445, %v4069
  %v4156 = vadd.f32 %v3446, %v4074
  %v4157 = vadd.f32 %v3447, %v4079
  %v4158 = vadd.f32 %v3448, %v4084
  %v4159 = vadd.f32 %v3449, %v4089
  %v4160 = vadd.f32 %v3450, %v4094
  %s4161 = scalar_lea.vmem %s0, 48
  %v4162 = vld [vmem:[%s4161] sm:$0xff]
  %v4163 = vld [vmem:[%s4161 + $0x8] sm:$0xff]
  %v4164 = vld [vmem:[%s4161 + $0x18] sm:$0xff]
  %v4165 = vld [vmem:[%s4161 + $0x20] sm:$0xff]
  %v4166 = vld [vmem:[%s4161 + $0x30] sm:$0xff]
  %v4167 = vld [vmem:[%s4161 + $0x38] sm:$0xff]
  %v4168 = vld [vmem:[%s4161 + $0x48] sm:$0xff]
  %v4169 = vld [vmem:[%s4161 + $0x50] sm:$0xff]
  %v4170 = vld [vmem:[%s4161 + $0x60] sm:$0xff]
  %v4171 = vld [vmem:[%s4161 + $0x68] sm:$0xff]
  %v4172 = vld [vmem:[%s4161 + $0x78] sm:$0xff]
  %v4173 = vld [vmem:[%s4161 + $0x80] sm:$0xff]
  %v4174 = vld [vmem:[%s4161 + $0x90] sm:$0xff]
  %v4175 = vld [vmem:[%s4161 + $0x98] sm:$0xff]
  %v4176 = vld [vmem:[%s4161 + $0xa8] sm:$0xff]
  %v4177 = vld [vmem:[%s4161 + $0xb0] sm:$0xff]
  %v4178 = vld [vmem:[%s4161 + $0xc0] sm:$0xff]
  %v4179 = vld [vmem:[%s4161 + $0xc8] sm:$0xff]
  %v4180 = vld [vmem:[%s4161 + $0xd8] sm:$0xff]
  %v4181 = vld [vmem:[%s4161 + $0xe0] sm:$0xff]
  %v4182 = vld [vmem:[%s4161 + $0xf0] sm:$0xff]
  %v4183 = vld [vmem:[%s4161 + $0xf8] sm:$0xff]
  %v4184 = vld [vmem:[%s4161 + $0x108] sm:$0xff]
  %v4185 = vld [vmem:[%s4161 + $0x110] sm:$0xff]
  %v4186 = vld [vmem:[%s4161 + $0x120] sm:$0xff]
  %v4187 = vld [vmem:[%s4161 + $0x128] sm:$0xff]
  %v4188 = vld [vmem:[%s4161 + $0x138] sm:$0xff]
  %v4189 = vld [vmem:[%s4161 + $0x140] sm:$0xff]
  %v4190 = vld [vmem:[%s4161 + $0x150] sm:$0xff]
  %v4191 = vld [vmem:[%s4161 + $0x158] sm:$0xff]
  %v4192 = vld [vmem:[%s4161 + $0x168] sm:$0xff]
  %v4193 = vld [vmem:[%s4161 + $0x170] sm:$0xff]
  %v4194 = vld [vmem:[%s4161 + $0x1b0] sm:$0xff]
  %v4195 = vld [vmem:[%s4161 + $0x1b8] sm:$0xff]
  %v4196 = vld [vmem:[%s4161 + $0x1c8] sm:$0xff]
  %v4197 = vld [vmem:[%s4161 + $0x1d0] sm:$0xff]
  %v4198 = vld [vmem:[%s4161 + $0x1e0] sm:$0xff]
  %v4199 = vld [vmem:[%s4161 + $0x1e8] sm:$0xff]
  %v4200 = vld [vmem:[%s4161 + $0x1f8] sm:$0xff]
  %v4201 = vld [vmem:[%s4161 + $0x200] sm:$0xff]
  %v4202 = vld [vmem:[%s4161 + $0x210] sm:$0xff]
  %v4203 = vld [vmem:[%s4161 + $0x218] sm:$0xff]
  %v4204 = vld [vmem:[%s4161 + $0x228] sm:$0xff]
  %v4205 = vld [vmem:[%s4161 + $0x230] sm:$0xff]
  %v4206 = vld [vmem:[%s4161 + $0x240] sm:$0xff]
  %v4207 = vld [vmem:[%s4161 + $0x248] sm:$0xff]
  %v4208 = vld [vmem:[%s4161 + $0x258] sm:$0xff]
  %v4209 = vld [vmem:[%s4161 + $0x260] sm:$0xff]
  %v4210 = vld [vmem:[%s4161 + $0x270] sm:$0xff]
  %v4211 = vld [vmem:[%s4161 + $0x278] sm:$0xff]
  %v4212 = vld [vmem:[%s4161 + $0x288] sm:$0xff]
  %v4213 = vld [vmem:[%s4161 + $0x290] sm:$0xff]
  %v4214 = vld [vmem:[%s4161 + $0x2a0] sm:$0xff]
  %v4215 = vld [vmem:[%s4161 + $0x2a8] sm:$0xff]
  %v4216 = vld [vmem:[%s4161 + $0x2b8] sm:$0xff]
  %v4217 = vld [vmem:[%s4161 + $0x2c0] sm:$0xff]
  %v4218 = vld [vmem:[%s4161 + $0x2d0] sm:$0xff]
  %v4219 = vld [vmem:[%s4161 + $0x2d8] sm:$0xff]
  %v4220 = vld [vmem:[%s4161 + $0x2e8] sm:$0xff]
  %v4221 = vld [vmem:[%s4161 + $0x2f0] sm:$0xff]
  %v4222 = vld [vmem:[%s4161 + $0x300] sm:$0xff]
  %v4223 = vld [vmem:[%s4161 + $0x308] sm:$0xff]
  %v4224 = vld [vmem:[%s4161 + $0x318] sm:$0xff]
  %v4225 = vld [vmem:[%s4161 + $0x320] sm:$0xff]
  %s4226 = scalar_lea.vmem %s1, 24
  %v4227 = vld [vmem:[%s4226] sm:$0xf]
  %v4229 = vsel %vm158, %v4162, 0
  %v4232 = vsel %vm158, %v4163, 0
  %v4235 = vsel %vm158, %v4164, 0
  %v4238 = vsel %vm158, %v4165, 0
  %v4241 = vsel %vm158, %v4166, 0
  %v4244 = vsel %vm158, %v4167, 0
  %v4247 = vsel %vm158, %v4168, 0
  %v4250 = vsel %vm158, %v4169, 0
  %v4253 = vsel %vm158, %v4170, 0
  %v4256 = vsel %vm158, %v4171, 0
  %v4259 = vsel %vm158, %v4172, 0
  %v4262 = vsel %vm158, %v4173, 0
  %v4265 = vsel %vm158, %v4174, 0
  %v4268 = vsel %vm158, %v4175, 0
  %v4271 = vsel %vm158, %v4176, 0
  %v4274 = vsel %vm158, %v4177, 0
  %v4277 = vsel %vm158, %v4178, 0
  %v4280 = vsel %vm158, %v4179, 0
  %v4283 = vsel %vm158, %v4180, 0
  %v4286 = vsel %vm158, %v4181, 0
  %v4289 = vsel %vm158, %v4182, 0
  %v4292 = vsel %vm158, %v4183, 0
  %v4295 = vsel %vm158, %v4184, 0
  %v4298 = vsel %vm158, %v4185, 0
  %v4301 = vsel %vm158, %v4186, 0
  %v4304 = vsel %vm158, %v4187, 0
  %v4307 = vsel %vm158, %v4188, 0
  %v4310 = vsel %vm158, %v4189, 0
  %v4313 = vsel %vm158, %v4190, 0
  %v4316 = vsel %vm158, %v4191, 0
  %v4319 = vsel %vm158, %v4192, 0
  %v4322 = vsel %vm158, %v4193, 0
  %v4325 = vsel %vm158, %v4194, 0
  %v4328 = vsel %vm158, %v4195, 0
  %v4331 = vsel %vm158, %v4196, 0
  %v4334 = vsel %vm158, %v4197, 0
  %v4337 = vsel %vm158, %v4198, 0
  %v4340 = vsel %vm158, %v4199, 0
  %v4343 = vsel %vm158, %v4200, 0
  %v4346 = vsel %vm158, %v4201, 0
  %v4349 = vsel %vm158, %v4202, 0
  %v4352 = vsel %vm158, %v4203, 0
  %v4355 = vsel %vm158, %v4204, 0
  %v4358 = vsel %vm158, %v4205, 0
  %v4361 = vsel %vm158, %v4206, 0
  %v4364 = vsel %vm158, %v4207, 0
  %v4367 = vsel %vm158, %v4208, 0
  %v4370 = vsel %vm158, %v4209, 0
  %v4373 = vsel %vm158, %v4210, 0
  %v4376 = vsel %vm158, %v4211, 0
  %v4379 = vsel %vm158, %v4212, 0
  %v4382 = vsel %vm158, %v4213, 0
  %v4385 = vsel %vm158, %v4214, 0
  %v4388 = vsel %vm158, %v4215, 0
  %v4391 = vsel %vm158, %v4216, 0
  %v4394 = vsel %vm158, %v4217, 0
  %v4397 = vsel %vm158, %v4218, 0
  %v4400 = vsel %vm158, %v4219, 0
  %v4403 = vsel %vm158, %v4220, 0
  %v4406 = vsel %vm158, %v4221, 0
  %v4409 = vsel %vm158, %v4222, 0
  %v4412 = vsel %vm158, %v4223, 0
  %v4415 = vsel %vm158, %v4224, 0
  %v4418 = vsel %vm158, %v4225, 0
  %v4421 = vsel %vm351, %v4227, 0
  %4423 = vmatprep.subr.mxu0 0.0
  %4424 = vmatpush1.msra.mxu0 0.0
  %4425 = vmatprep.subr.mxu0 0.0
  %4426 = vmatpush1.msra.mxu0 0.0
  %4427 = vmatprep.subr.mxu0 0.0
  %4428 = vmatpush1.msra.mxu0 0.0
  %4429 = vmatprep.subr.mxu0 0.0
  %4430 = vmatpush1.msra.mxu0 0.0
  %4431 = vmatprep.subr.mxu0 0.0
  %4432 = vmatpush1.msra.mxu0 0.0
  %4433 = vmatprep.subr.mxu0 0.0
  %4434 = vmatpush1.msra.mxu0 0.0
  %4435 = vmatprep.subr.mxu0 0.0
  %4436 = vmatpush1.msra.mxu0 0.0
  %4437 = vmatprep.subr.mxu0 0.0
  %4438 = vmatpush1.msra.mxu0 0.0
  %4439 = vmatprep.subr.mxu0 0.0
  %4440 = vmatpush1.msra.mxu0 0.0
  %4441 = vmatprep.subr.mxu0 0.0
  %4442 = vmatpush1.msra.mxu0 0.0
  %4443 = vmatprep.subr.mxu0 0.0
  %4444 = vmatpush1.msra.mxu0 0.0
  %4445 = vmatprep.subr.mxu0 0.0
  %4446 = vmatpush1.msra.mxu0 0.0
  %4447 = vmatprep.subr.mxu0 0.0
  %4448 = vmatpush1.msra.mxu0 0.0
  %4449 = vmatprep.subr.mxu0 0.0
  %4450 = vmatpush1.msra.mxu0 0.0
  %4451 = vmatprep.subr.mxu0 0.0
  %4452 = vmatpush1.msra.mxu0 0.0
  %4453 = vmatprep.subr.mxu0 0.0
  %4454 = vmatpush1.msra.mxu0 %v4421
  %4455 = vmatprep.subr.mxu0 0.0
  %4456 = vmatpush2.msra.mxu0 0.0
  %4457 = vmatprep.subr.mxu0 0.0
  %4458 = vmatpush2.msra.mxu0 0.0
  %4459 = vmatprep.subr.mxu0 0.0
  %4460 = vmatpush2.msra.mxu0 0.0
  %4461 = vmatprep.subr.mxu0 0.0
  %4462 = vmatpush2.msra.mxu0 0.0
  %4463 = vmatprep.subr.mxu0 0.0
  %4464 = vmatpush2.msra.mxu0 0.0
  %4465 = vmatprep.subr.mxu0 0.0
  %4466 = vmatpush2.msra.mxu0 0.0
  %4467 = vmatprep.subr.mxu0 0.0
  %4468 = vmatpush2.msra.mxu0 0.0
  %4469 = vmatprep.subr.mxu0 0.0
  %4470 = vmatpush2.msra.mxu0 0.0
  %4471 = vmatprep.subr.mxu0 0.0
  %4472 = vmatpush2.msra.mxu0 0.0
  %4473 = vmatprep.subr.mxu0 0.0
  %4474 = vmatpush2.msra.mxu0 0.0
  %4475 = vmatprep.subr.mxu0 0.0
  %4476 = vmatpush2.msra.mxu0 0.0
  %4477 = vmatprep.subr.mxu0 0.0
  %4478 = vmatpush2.msra.mxu0 0.0
  %4479 = vmatprep.subr.mxu0 0.0
  %4480 = vmatpush2.msra.mxu0 0.0
  %4481 = vmatprep.subr.mxu0 0.0
  %4482 = vmatpush2.msra.mxu0 0.0
  %4483 = vmatprep.subr.mxu0 0.0
  %4484 = vmatpush2.msra.mxu0 0.0
  %4485 = vmatprep.subr.mxu0 0.0
  %4486 = vmatpush2.msra.mxu0 0.0
  %4487 = vmatprep.mubr.f32.mxu0 0.0
  %4488 = vmatmul.mubr.f32.gmra.mxu0 %v4229
  %v4489 = vpop.f32.mrf.mxu0
  %v4490 = vadd.f32 0.0, %v4489
  %v4491 = vpop.f32.mrf.mxu0
  %4492 = vmatprep.mubr.f32.mxu0 0.0
  %4493 = vmatmul.mubr.f32.gmra.mxu0 %v4232
  %v4494 = vpop.f32.mrf.mxu0
  %v4495 = vadd.f32 0.0, %v4494
  %v4496 = vpop.f32.mrf.mxu0
  %4497 = vmatprep.mubr.f32.mxu0 0.0
  %4498 = vmatmul.mubr.f32.gmra.mxu0 %v4235
  %v4499 = vpop.f32.mrf.mxu0
  %v4500 = vadd.f32 0.0, %v4499
  %v4501 = vpop.f32.mrf.mxu0
  %4502 = vmatprep.mubr.f32.mxu0 0.0
  %4503 = vmatmul.mubr.f32.gmra.mxu0 %v4238
  %v4504 = vpop.f32.mrf.mxu0
  %v4505 = vadd.f32 0.0, %v4504
  %v4506 = vpop.f32.mrf.mxu0
  %4507 = vmatprep.mubr.f32.mxu0 0.0
  %4508 = vmatmul.mubr.f32.gmra.mxu0 %v4241
  %v4509 = vpop.f32.mrf.mxu0
  %v4510 = vadd.f32 0.0, %v4509
  %v4511 = vpop.f32.mrf.mxu0
  %4512 = vmatprep.mubr.f32.mxu0 0.0
  %4513 = vmatmul.mubr.f32.gmra.mxu0 %v4244
  %v4514 = vpop.f32.mrf.mxu0
  %v4515 = vadd.f32 0.0, %v4514
  %v4516 = vpop.f32.mrf.mxu0
  %4517 = vmatprep.mubr.f32.mxu0 0.0
  %4518 = vmatmul.mubr.f32.gmra.mxu0 %v4247
  %v4519 = vpop.f32.mrf.mxu0
  %v4520 = vadd.f32 0.0, %v4519
  %v4521 = vpop.f32.mrf.mxu0
  %4522 = vmatprep.mubr.f32.mxu0 0.0
  %4523 = vmatmul.mubr.f32.gmra.mxu0 %v4250
  %v4524 = vpop.f32.mrf.mxu0
  %v4525 = vadd.f32 0.0, %v4524
  %v4526 = vpop.f32.mrf.mxu0
  %4527 = vmatprep.mubr.f32.mxu0 0.0
  %4528 = vmatmul.mubr.f32.gmra.mxu0 %v4253
  %v4529 = vpop.f32.mrf.mxu0
  %v4530 = vadd.f32 0.0, %v4529
  %v4531 = vpop.f32.mrf.mxu0
  %4532 = vmatprep.mubr.f32.mxu0 0.0
  %4533 = vmatmul.mubr.f32.gmra.mxu0 %v4256
  %v4534 = vpop.f32.mrf.mxu0
  %v4535 = vadd.f32 0.0, %v4534
  %v4536 = vpop.f32.mrf.mxu0
  %4537 = vmatprep.mubr.f32.mxu0 0.0
  %4538 = vmatmul.mubr.f32.gmra.mxu0 %v4259
  %v4539 = vpop.f32.mrf.mxu0
  %v4540 = vadd.f32 0.0, %v4539
  %v4541 = vpop.f32.mrf.mxu0
  %4542 = vmatprep.mubr.f32.mxu0 0.0
  %4543 = vmatmul.mubr.f32.gmra.mxu0 %v4262
  %v4544 = vpop.f32.mrf.mxu0
  %v4545 = vadd.f32 0.0, %v4544
  %v4546 = vpop.f32.mrf.mxu0
  %4547 = vmatprep.mubr.f32.mxu0 0.0
  %4548 = vmatmul.mubr.f32.gmra.mxu0 %v4265
  %v4549 = vpop.f32.mrf.mxu0
  %v4550 = vadd.f32 0.0, %v4549
  %v4551 = vpop.f32.mrf.mxu0
  %4552 = vmatprep.mubr.f32.mxu0 0.0
  %4553 = vmatmul.mubr.f32.gmra.mxu0 %v4268
  %v4554 = vpop.f32.mrf.mxu0
  %v4555 = vadd.f32 0.0, %v4554
  %v4556 = vpop.f32.mrf.mxu0
  %4557 = vmatprep.mubr.f32.mxu0 0.0
  %4558 = vmatmul.mubr.f32.gmra.mxu0 %v4271
  %v4559 = vpop.f32.mrf.mxu0
  %v4560 = vadd.f32 0.0, %v4559
  %v4561 = vpop.f32.mrf.mxu0
  %4562 = vmatprep.mubr.f32.mxu0 0.0
  %4563 = vmatmul.mubr.f32.gmra.mxu0 %v4274
  %v4564 = vpop.f32.mrf.mxu0
  %v4565 = vadd.f32 0.0, %v4564
  %v4566 = vpop.f32.mrf.mxu0
  %4567 = vmatprep.mubr.f32.mxu0 0.0
  %4568 = vmatmul.mubr.f32.gmra.mxu0 %v4277
  %v4569 = vpop.f32.mrf.mxu0
  %v4570 = vadd.f32 0.0, %v4569
  %v4571 = vpop.f32.mrf.mxu0
  %4572 = vmatprep.mubr.f32.mxu0 0.0
  %4573 = vmatmul.mubr.f32.gmra.mxu0 %v4280
  %v4574 = vpop.f32.mrf.mxu0
  %v4575 = vadd.f32 0.0, %v4574
  %v4576 = vpop.f32.mrf.mxu0
  %4577 = vmatprep.mubr.f32.mxu0 0.0
  %4578 = vmatmul.mubr.f32.gmra.mxu0 %v4283
  %v4579 = vpop.f32.mrf.mxu0
  %v4580 = vadd.f32 0.0, %v4579
  %v4581 = vpop.f32.mrf.mxu0
  %4582 = vmatprep.mubr.f32.mxu0 0.0
  %4583 = vmatmul.mubr.f32.gmra.mxu0 %v4286
  %v4584 = vpop.f32.mrf.mxu0
  %v4585 = vadd.f32 0.0, %v4584
  %v4586 = vpop.f32.mrf.mxu0
  %4587 = vmatprep.mubr.f32.mxu0 0.0
  %4588 = vmatmul.mubr.f32.gmra.mxu0 %v4289
  %v4589 = vpop.f32.mrf.mxu0
  %v4590 = vadd.f32 0.0, %v4589
  %v4591 = vpop.f32.mrf.mxu0
  %4592 = vmatprep.mubr.f32.mxu0 0.0
  %4593 = vmatmul.mubr.f32.gmra.mxu0 %v4292
  %v4594 = vpop.f32.mrf.mxu0
  %v4595 = vadd.f32 0.0, %v4594
  %v4596 = vpop.f32.mrf.mxu0
  %4597 = vmatprep.mubr.f32.mxu0 0.0
  %4598 = vmatmul.mubr.f32.gmra.mxu0 %v4295
  %v4599 = vpop.f32.mrf.mxu0
  %v4600 = vadd.f32 0.0, %v4599
  %v4601 = vpop.f32.mrf.mxu0
  %4602 = vmatprep.mubr.f32.mxu0 0.0
  %4603 = vmatmul.mubr.f32.gmra.mxu0 %v4298
  %v4604 = vpop.f32.mrf.mxu0
  %v4605 = vadd.f32 0.0, %v4604
  %v4606 = vpop.f32.mrf.mxu0
  %4607 = vmatprep.mubr.f32.mxu0 0.0
  %4608 = vmatmul.mubr.f32.gmra.mxu0 %v4301
  %v4609 = vpop.f32.mrf.mxu0
  %v4610 = vadd.f32 0.0, %v4609
  %v4611 = vpop.f32.mrf.mxu0
  %4612 = vmatprep.mubr.f32.mxu0 0.0
  %4613 = vmatmul.mubr.f32.gmra.mxu0 %v4304
  %v4614 = vpop.f32.mrf.mxu0
  %v4615 = vadd.f32 0.0, %v4614
  %v4616 = vpop.f32.mrf.mxu0
  %4617 = vmatprep.mubr.f32.mxu0 0.0
  %4618 = vmatmul.mubr.f32.gmra.mxu0 %v4307
  %v4619 = vpop.f32.mrf.mxu0
  %v4620 = vadd.f32 0.0, %v4619
  %v4621 = vpop.f32.mrf.mxu0
  %4622 = vmatprep.mubr.f32.mxu0 0.0
  %4623 = vmatmul.mubr.f32.gmra.mxu0 %v4310
  %v4624 = vpop.f32.mrf.mxu0
  %v4625 = vadd.f32 0.0, %v4624
  %v4626 = vpop.f32.mrf.mxu0
  %4627 = vmatprep.mubr.f32.mxu0 0.0
  %4628 = vmatmul.mubr.f32.gmra.mxu0 %v4313
  %v4629 = vpop.f32.mrf.mxu0
  %v4630 = vadd.f32 0.0, %v4629
  %v4631 = vpop.f32.mrf.mxu0
  %4632 = vmatprep.mubr.f32.mxu0 0.0
  %4633 = vmatmul.mubr.f32.gmra.mxu0 %v4316
  %v4634 = vpop.f32.mrf.mxu0
  %v4635 = vadd.f32 0.0, %v4634
  %v4636 = vpop.f32.mrf.mxu0
  %4637 = vmatprep.mubr.f32.mxu0 0.0
  %4638 = vmatmul.mubr.f32.gmra.mxu0 %v4319
  %v4639 = vpop.f32.mrf.mxu0
  %v4640 = vadd.f32 0.0, %v4639
  %v4641 = vpop.f32.mrf.mxu0
  %4642 = vmatprep.mubr.f32.mxu0 0.0
  %4643 = vmatmul.mubr.f32.gmra.mxu0 %v4322
  %v4644 = vpop.f32.mrf.mxu0
  %v4645 = vadd.f32 0.0, %v4644
  %v4646 = vpop.f32.mrf.mxu0
  %4647 = vmatprep.mubr.f32.mxu0 0.0
  %4648 = vmatmul.mubr.f32.gmra.mxu0 %v4325
  %v4649 = vpop.f32.mrf.mxu0
  %v4650 = vadd.f32 0.0, %v4649
  %v4651 = vpop.f32.mrf.mxu0
  %4652 = vmatprep.mubr.f32.mxu0 0.0
  %4653 = vmatmul.mubr.f32.gmra.mxu0 %v4328
  %v4654 = vpop.f32.mrf.mxu0
  %v4655 = vadd.f32 0.0, %v4654
  %v4656 = vpop.f32.mrf.mxu0
  %4657 = vmatprep.mubr.f32.mxu0 0.0
  %4658 = vmatmul.mubr.f32.gmra.mxu0 %v4331
  %v4659 = vpop.f32.mrf.mxu0
  %v4660 = vadd.f32 0.0, %v4659
  %v4661 = vpop.f32.mrf.mxu0
  %4662 = vmatprep.mubr.f32.mxu0 0.0
  %4663 = vmatmul.mubr.f32.gmra.mxu0 %v4334
  %v4664 = vpop.f32.mrf.mxu0
  %v4665 = vadd.f32 0.0, %v4664
  %v4666 = vpop.f32.mrf.mxu0
  %4667 = vmatprep.mubr.f32.mxu0 0.0
  %4668 = vmatmul.mubr.f32.gmra.mxu0 %v4337
  %v4669 = vpop.f32.mrf.mxu0
  %v4670 = vadd.f32 0.0, %v4669
  %v4671 = vpop.f32.mrf.mxu0
  %4672 = vmatprep.mubr.f32.mxu0 0.0
  %4673 = vmatmul.mubr.f32.gmra.mxu0 %v4340
  %v4674 = vpop.f32.mrf.mxu0
  %v4675 = vadd.f32 0.0, %v4674
  %v4676 = vpop.f32.mrf.mxu0
  %4677 = vmatprep.mubr.f32.mxu0 0.0
  %4678 = vmatmul.mubr.f32.gmra.mxu0 %v4343
  %v4679 = vpop.f32.mrf.mxu0
  %v4680 = vadd.f32 0.0, %v4679
  %v4681 = vpop.f32.mrf.mxu0
  %4682 = vmatprep.mubr.f32.mxu0 0.0
  %4683 = vmatmul.mubr.f32.gmra.mxu0 %v4346
  %v4684 = vpop.f32.mrf.mxu0
  %v4685 = vadd.f32 0.0, %v4684
  %v4686 = vpop.f32.mrf.mxu0
  %4687 = vmatprep.mubr.f32.mxu0 0.0
  %4688 = vmatmul.mubr.f32.gmra.mxu0 %v4349
  %v4689 = vpop.f32.mrf.mxu0
  %v4690 = vadd.f32 0.0, %v4689
  %v4691 = vpop.f32.mrf.mxu0
  %4692 = vmatprep.mubr.f32.mxu0 0.0
  %4693 = vmatmul.mubr.f32.gmra.mxu0 %v4352
  %v4694 = vpop.f32.mrf.mxu0
  %v4695 = vadd.f32 0.0, %v4694
  %v4696 = vpop.f32.mrf.mxu0
  %4697 = vmatprep.mubr.f32.mxu0 0.0
  %4698 = vmatmul.mubr.f32.gmra.mxu0 %v4355
  %v4699 = vpop.f32.mrf.mxu0
  %v4700 = vadd.f32 0.0, %v4699
  %v4701 = vpop.f32.mrf.mxu0
  %4702 = vmatprep.mubr.f32.mxu0 0.0
  %4703 = vmatmul.mubr.f32.gmra.mxu0 %v4358
  %v4704 = vpop.f32.mrf.mxu0
  %v4705 = vadd.f32 0.0, %v4704
  %v4706 = vpop.f32.mrf.mxu0
  %4707 = vmatprep.mubr.f32.mxu0 0.0
  %4708 = vmatmul.mubr.f32.gmra.mxu0 %v4361
  %v4709 = vpop.f32.mrf.mxu0
  %v4710 = vadd.f32 0.0, %v4709
  %v4711 = vpop.f32.mrf.mxu0
  %4712 = vmatprep.mubr.f32.mxu0 0.0
  %4713 = vmatmul.mubr.f32.gmra.mxu0 %v4364
  %v4714 = vpop.f32.mrf.mxu0
  %v4715 = vadd.f32 0.0, %v4714
  %v4716 = vpop.f32.mrf.mxu0
  %4717 = vmatprep.mubr.f32.mxu0 0.0
  %4718 = vmatmul.mubr.f32.gmra.mxu0 %v4367
  %v4719 = vpop.f32.mrf.mxu0
  %v4720 = vadd.f32 0.0, %v4719
  %v4721 = vpop.f32.mrf.mxu0
  %4722 = vmatprep.mubr.f32.mxu0 0.0
  %4723 = vmatmul.mubr.f32.gmra.mxu0 %v4370
  %v4724 = vpop.f32.mrf.mxu0
  %v4725 = vadd.f32 0.0, %v4724
  %v4726 = vpop.f32.mrf.mxu0
  %4727 = vmatprep.mubr.f32.mxu0 0.0
  %4728 = vmatmul.mubr.f32.gmra.mxu0 %v4373
  %v4729 = vpop.f32.mrf.mxu0
  %v4730 = vadd.f32 0.0, %v4729
  %v4731 = vpop.f32.mrf.mxu0
  %4732 = vmatprep.mubr.f32.mxu0 0.0
  %4733 = vmatmul.mubr.f32.gmra.mxu0 %v4376
  %v4734 = vpop.f32.mrf.mxu0
  %v4735 = vadd.f32 0.0, %v4734
  %v4736 = vpop.f32.mrf.mxu0
  %4737 = vmatprep.mubr.f32.mxu0 0.0
  %4738 = vmatmul.mubr.f32.gmra.mxu0 %v4379
  %v4739 = vpop.f32.mrf.mxu0
  %v4740 = vadd.f32 0.0, %v4739
  %v4741 = vpop.f32.mrf.mxu0
  %4742 = vmatprep.mubr.f32.mxu0 0.0
  %4743 = vmatmul.mubr.f32.gmra.mxu0 %v4382
  %v4744 = vpop.f32.mrf.mxu0
  %v4745 = vadd.f32 0.0, %v4744
  %v4746 = vpop.f32.mrf.mxu0
  %4747 = vmatprep.mubr.f32.mxu0 0.0
  %4748 = vmatmul.mubr.f32.gmra.mxu0 %v4385
  %v4749 = vpop.f32.mrf.mxu0
  %v4750 = vadd.f32 0.0, %v4749
  %v4751 = vpop.f32.mrf.mxu0
  %4752 = vmatprep.mubr.f32.mxu0 0.0
  %4753 = vmatmul.mubr.f32.gmra.mxu0 %v4388
  %v4754 = vpop.f32.mrf.mxu0
  %v4755 = vadd.f32 0.0, %v4754
  %v4756 = vpop.f32.mrf.mxu0
  %4757 = vmatprep.mubr.f32.mxu0 0.0
  %4758 = vmatmul.mubr.f32.gmra.mxu0 %v4391
  %v4759 = vpop.f32.mrf.mxu0
  %v4760 = vadd.f32 0.0, %v4759
  %v4761 = vpop.f32.mrf.mxu0
  %4762 = vmatprep.mubr.f32.mxu0 0.0
  %4763 = vmatmul.mubr.f32.gmra.mxu0 %v4394
  %v4764 = vpop.f32.mrf.mxu0
  %v4765 = vadd.f32 0.0, %v4764
  %v4766 = vpop.f32.mrf.mxu0
  %4767 = vmatprep.mubr.f32.mxu0 0.0
  %4768 = vmatmul.mubr.f32.gmra.mxu0 %v4397
  %v4769 = vpop.f32.mrf.mxu0
  %v4770 = vadd.f32 0.0, %v4769
  %v4771 = vpop.f32.mrf.mxu0
  %4772 = vmatprep.mubr.f32.mxu0 0.0
  %4773 = vmatmul.mubr.f32.gmra.mxu0 %v4400
  %v4774 = vpop.f32.mrf.mxu0
  %v4775 = vadd.f32 0.0, %v4774
  %v4776 = vpop.f32.mrf.mxu0
  %4777 = vmatprep.mubr.f32.mxu0 0.0
  %4778 = vmatmul.mubr.f32.gmra.mxu0 %v4403
  %v4779 = vpop.f32.mrf.mxu0
  %v4780 = vadd.f32 0.0, %v4779
  %v4781 = vpop.f32.mrf.mxu0
  %4782 = vmatprep.mubr.f32.mxu0 0.0
  %4783 = vmatmul.mubr.f32.gmra.mxu0 %v4406
  %v4784 = vpop.f32.mrf.mxu0
  %v4785 = vadd.f32 0.0, %v4784
  %v4786 = vpop.f32.mrf.mxu0
  %4787 = vmatprep.mubr.f32.mxu0 0.0
  %4788 = vmatmul.mubr.f32.gmra.mxu0 %v4409
  %v4789 = vpop.f32.mrf.mxu0
  %v4790 = vadd.f32 0.0, %v4789
  %v4791 = vpop.f32.mrf.mxu0
  %4792 = vmatprep.mubr.f32.mxu0 0.0
  %4793 = vmatmul.mubr.f32.gmra.mxu0 %v4412
  %v4794 = vpop.f32.mrf.mxu0
  %v4795 = vadd.f32 0.0, %v4794
  %v4796 = vpop.f32.mrf.mxu0
  %4797 = vmatprep.mubr.f32.mxu0 0.0
  %4798 = vmatmul.mubr.f32.gmra.mxu0 %v4415
  %v4799 = vpop.f32.mrf.mxu0
  %v4800 = vadd.f32 0.0, %v4799
  %v4801 = vpop.f32.mrf.mxu0
  %4802 = vmatprep.mubr.f32.mxu0 0.0
  %4803 = vmatmul.mubr.f32.gmra.mxu0 %v4418
  %v4804 = vpop.f32.mrf.mxu0
  %v4805 = vadd.f32 0.0, %v4804
  %v4806 = vpop.f32.mrf.mxu0
  %4807 = vdwg.mxu0
  %v4808 = vadd.f32 %v4097, %v4490
  %v4809 = vadd.f32 %v4098, %v4495
  %v4810 = vadd.f32 %v4099, %v4500
  %v4811 = vadd.f32 %v4100, %v4505
  %v4812 = vadd.f32 %v4101, %v4510
  %v4813 = vadd.f32 %v4102, %v4515
  %v4814 = vadd.f32 %v4103, %v4520
  %v4815 = vadd.f32 %v4104, %v4525
  %v4816 = vadd.f32 %v4105, %v4530
  %v4817 = vadd.f32 %v4106, %v4535
  %v4818 = vadd.f32 %v4107, %v4540
  %v4819 = vadd.f32 %v4108, %v4545
  %v4820 = vadd.f32 %v4109, %v4550
  %v4821 = vadd.f32 %v4110, %v4555
  %v4822 = vadd.f32 %v4111, %v4560
  %v4823 = vadd.f32 %v4112, %v4565
  %v4824 = vadd.f32 %v4113, %v4570
  %v4825 = vadd.f32 %v4114, %v4575
  %v4826 = vadd.f32 %v4115, %v4580
  %v4827 = vadd.f32 %v4116, %v4585
  %v4828 = vadd.f32 %v4117, %v4590
  %v4829 = vadd.f32 %v4118, %v4595
  %v4830 = vadd.f32 %v4119, %v4600
  %v4831 = vadd.f32 %v4120, %v4605
  %v4832 = vadd.f32 %v4121, %v4610
  %v4833 = vadd.f32 %v4122, %v4615
  %v4834 = vadd.f32 %v4123, %v4620
  %v4835 = vadd.f32 %v4124, %v4625
  %v4836 = vadd.f32 %v4125, %v4630
  %v4837 = vadd.f32 %v4126, %v4635
  %v4838 = vadd.f32 %v4127, %v4640
  %v4839 = vadd.f32 %v4128, %v4645
  %v4840 = vadd.f32 %v4129, %v4650
  %v4841 = vadd.f32 %v4130, %v4655
  %v4842 = vadd.f32 %v4131, %v4660
  %v4843 = vadd.f32 %v4132, %v4665
  %v4844 = vadd.f32 %v4133, %v4670
  %v4845 = vadd.f32 %v4134, %v4675
  %v4846 = vadd.f32 %v4135, %v4680
  %v4847 = vadd.f32 %v4136, %v4685
  %v4848 = vadd.f32 %v4137, %v4690
  %v4849 = vadd.f32 %v4138, %v4695
  %v4850 = vadd.f32 %v4139, %v4700
  %v4851 = vadd.f32 %v4140, %v4705
  %v4852 = vadd.f32 %v4141, %v4710
  %v4853 = vadd.f32 %v4142, %v4715
  %v4854 = vadd.f32 %v4143, %v4720
  %v4855 = vadd.f32 %v4144, %v4725
  %v4856 = vadd.f32 %v4145, %v4730
  %v4857 = vadd.f32 %v4146, %v4735
  %v4858 = vadd.f32 %v4147, %v4740
  %v4859 = vadd.f32 %v4148, %v4745
  %v4860 = vadd.f32 %v4149, %v4750
  %v4861 = vadd.f32 %v4150, %v4755
  %v4862 = vadd.f32 %v4151, %v4760
  %v4863 = vadd.f32 %v4152, %v4765
  %v4864 = vadd.f32 %v4153, %v4770
  %v4865 = vadd.f32 %v4154, %v4775
  %v4866 = vadd.f32 %v4155, %v4780
  %v4867 = vadd.f32 %v4156, %v4785
  %v4868 = vadd.f32 %v4157, %v4790
  %v4869 = vadd.f32 %v4158, %v4795
  %v4870 = vadd.f32 %v4159, %v4800
  %v4871 = vadd.f32 %v4160, %v4805
  %v4872 = vld [vmem:[%s4161 + $0x1] sm:$0xff]
  %v4873 = vld [vmem:[%s4161 + $0x9] sm:$0xff]
  %v4874 = vld [vmem:[%s4161 + $0x19] sm:$0xff]
  %v4875 = vld [vmem:[%s4161 + $0x21] sm:$0xff]
  %v4876 = vld [vmem:[%s4161 + $0x31] sm:$0xff]
  %v4877 = vld [vmem:[%s4161 + $0x39] sm:$0xff]
  %v4878 = vld [vmem:[%s4161 + $0x49] sm:$0xff]
  %v4879 = vld [vmem:[%s4161 + $0x51] sm:$0xff]
  %v4880 = vld [vmem:[%s4161 + $0x61] sm:$0xff]
  %v4881 = vld [vmem:[%s4161 + $0x69] sm:$0xff]
  %v4882 = vld [vmem:[%s4161 + $0x79] sm:$0xff]
  %v4883 = vld [vmem:[%s4161 + $0x81] sm:$0xff]
  %v4884 = vld [vmem:[%s4161 + $0x91] sm:$0xff]
  %v4885 = vld [vmem:[%s4161 + $0x99] sm:$0xff]
  %v4886 = vld [vmem:[%s4161 + $0xa9] sm:$0xff]
  %v4887 = vld [vmem:[%s4161 + $0xb1] sm:$0xff]
  %v4888 = vld [vmem:[%s4161 + $0xc1] sm:$0xff]
  %v4889 = vld [vmem:[%s4161 + $0xc9] sm:$0xff]
  %v4890 = vld [vmem:[%s4161 + $0xd9] sm:$0xff]
  %v4891 = vld [vmem:[%s4161 + $0xe1] sm:$0xff]
  %v4892 = vld [vmem:[%s4161 + $0xf1] sm:$0xff]
  %v4893 = vld [vmem:[%s4161 + $0xf9] sm:$0xff]
  %v4894 = vld [vmem:[%s4161 + $0x109] sm:$0xff]
  %v4895 = vld [vmem:[%s4161 + $0x111] sm:$0xff]
  %v4896 = vld [vmem:[%s4161 + $0x121] sm:$0xff]
  %v4897 = vld [vmem:[%s4161 + $0x129] sm:$0xff]
  %v4898 = vld [vmem:[%s4161 + $0x139] sm:$0xff]
  %v4899 = vld [vmem:[%s4161 + $0x141] sm:$0xff]
  %v4900 = vld [vmem:[%s4161 + $0x151] sm:$0xff]
  %v4901 = vld [vmem:[%s4161 + $0x159] sm:$0xff]
  %v4902 = vld [vmem:[%s4161 + $0x169] sm:$0xff]
  %v4903 = vld [vmem:[%s4161 + $0x171] sm:$0xff]
  %v4904 = vld [vmem:[%s4161 + $0x1b1] sm:$0xff]
  %v4905 = vld [vmem:[%s4161 + $0x1b9] sm:$0xff]
  %v4906 = vld [vmem:[%s4161 + $0x1c9] sm:$0xff]
  %v4907 = vld [vmem:[%s4161 + $0x1d1] sm:$0xff]
  %v4908 = vld [vmem:[%s4161 + $0x1e1] sm:$0xff]
  %v4909 = vld [vmem:[%s4161 + $0x1e9] sm:$0xff]
  %v4910 = vld [vmem:[%s4161 + $0x1f9] sm:$0xff]
  %v4911 = vld [vmem:[%s4161 + $0x201] sm:$0xff]
  %v4912 = vld [vmem:[%s4161 + $0x211] sm:$0xff]
  %v4913 = vld [vmem:[%s4161 + $0x219] sm:$0xff]
  %v4914 = vld [vmem:[%s4161 + $0x229] sm:$0xff]
  %v4915 = vld [vmem:[%s4161 + $0x231] sm:$0xff]
  %v4916 = vld [vmem:[%s4161 + $0x241] sm:$0xff]
  %v4917 = vld [vmem:[%s4161 + $0x249] sm:$0xff]
  %v4918 = vld [vmem:[%s4161 + $0x259] sm:$0xff]
  %v4919 = vld [vmem:[%s4161 + $0x261] sm:$0xff]
  %v4920 = vld [vmem:[%s4161 + $0x271] sm:$0xff]
  %v4921 = vld [vmem:[%s4161 + $0x279] sm:$0xff]
  %v4922 = vld [vmem:[%s4161 + $0x289] sm:$0xff]
  %v4923 = vld [vmem:[%s4161 + $0x291] sm:$0xff]
  %v4924 = vld [vmem:[%s4161 + $0x2a1] sm:$0xff]
  %v4925 = vld [vmem:[%s4161 + $0x2a9] sm:$0xff]
  %v4926 = vld [vmem:[%s4161 + $0x2b9] sm:$0xff]
  %v4927 = vld [vmem:[%s4161 + $0x2c1] sm:$0xff]
  %v4928 = vld [vmem:[%s4161 + $0x2d1] sm:$0xff]
  %v4929 = vld [vmem:[%s4161 + $0x2d9] sm:$0xff]
  %v4930 = vld [vmem:[%s4161 + $0x2e9] sm:$0xff]
  %v4931 = vld [vmem:[%s4161 + $0x2f1] sm:$0xff]
  %v4932 = vld [vmem:[%s4161 + $0x301] sm:$0xff]
  %v4933 = vld [vmem:[%s4161 + $0x309] sm:$0xff]
  %v4934 = vld [vmem:[%s4161 + $0x319] sm:$0xff]
  %v4935 = vld [vmem:[%s4161 + $0x321] sm:$0xff]
  %s4936 = scalar_lea.vmem %s1, 28
  %v4937 = vld [vmem:[%s4936] sm:$0xf]
  %v4939 = vsel %vm158, %v4872, 0
  %v4942 = vsel %vm158, %v4873, 0
  %v4945 = vsel %vm158, %v4874, 0
  %v4948 = vsel %vm158, %v4875, 0
  %v4951 = vsel %vm158, %v4876, 0
  %v4954 = vsel %vm158, %v4877, 0
  %v4957 = vsel %vm158, %v4878, 0
  %v4960 = vsel %vm158, %v4879, 0
  %v4963 = vsel %vm158, %v4880, 0
  %v4966 = vsel %vm158, %v4881, 0
  %v4969 = vsel %vm158, %v4882, 0
  %v4972 = vsel %vm158, %v4883, 0
  %v4975 = vsel %vm158, %v4884, 0
  %v4978 = vsel %vm158, %v4885, 0
  %v4981 = vsel %vm158, %v4886, 0
  %v4984 = vsel %vm158, %v4887, 0
  %v4987 = vsel %vm158, %v4888, 0
  %v4990 = vsel %vm158, %v4889, 0
  %v4993 = vsel %vm158, %v4890, 0
  %v4996 = vsel %vm158, %v4891, 0
  %v4999 = vsel %vm158, %v4892, 0
  %v5002 = vsel %vm158, %v4893, 0
  %v5005 = vsel %vm158, %v4894, 0
  %v5008 = vsel %vm158, %v4895, 0
  %v5011 = vsel %vm158, %v4896, 0
  %v5014 = vsel %vm158, %v4897, 0
  %v5017 = vsel %vm158, %v4898, 0
  %v5020 = vsel %vm158, %v4899, 0
  %v5023 = vsel %vm158, %v4900, 0
  %v5026 = vsel %vm158, %v4901, 0
  %v5029 = vsel %vm158, %v4902, 0
  %v5032 = vsel %vm158, %v4903, 0
  %v5035 = vsel %vm158, %v4904, 0
  %v5038 = vsel %vm158, %v4905, 0
  %v5041 = vsel %vm158, %v4906, 0
  %v5044 = vsel %vm158, %v4907, 0
  %v5047 = vsel %vm158, %v4908, 0
  %v5050 = vsel %vm158, %v4909, 0
  %v5053 = vsel %vm158, %v4910, 0
  %v5056 = vsel %vm158, %v4911, 0
  %v5059 = vsel %vm158, %v4912, 0
  %v5062 = vsel %vm158, %v4913, 0
  %v5065 = vsel %vm158, %v4914, 0
  %v5068 = vsel %vm158, %v4915, 0
  %v5071 = vsel %vm158, %v4916, 0
  %v5074 = vsel %vm158, %v4917, 0
  %v5077 = vsel %vm158, %v4918, 0
  %v5080 = vsel %vm158, %v4919, 0
  %v5083 = vsel %vm158, %v4920, 0
  %v5086 = vsel %vm158, %v4921, 0
  %v5089 = vsel %vm158, %v4922, 0
  %v5092 = vsel %vm158, %v4923, 0
  %v5095 = vsel %vm158, %v4924, 0
  %v5098 = vsel %vm158, %v4925, 0
  %v5101 = vsel %vm158, %v4926, 0
  %v5104 = vsel %vm158, %v4927, 0
  %v5107 = vsel %vm158, %v4928, 0
  %v5110 = vsel %vm158, %v4929, 0
  %v5113 = vsel %vm158, %v4930, 0
  %v5116 = vsel %vm158, %v4931, 0
  %v5119 = vsel %vm158, %v4932, 0
  %v5122 = vsel %vm158, %v4933, 0
  %v5125 = vsel %vm158, %v4934, 0
  %v5128 = vsel %vm158, %v4935, 0
  %v5131 = vsel %vm351, %v4937, 0
  %5133 = vmatprep.subr.mxu0 0.0
  %5134 = vmatpush1.msra.mxu0 0.0
  %5135 = vmatprep.subr.mxu0 0.0
  %5136 = vmatpush1.msra.mxu0 0.0
  %5137 = vmatprep.subr.mxu0 0.0
  %5138 = vmatpush1.msra.mxu0 0.0
  %5139 = vmatprep.subr.mxu0 0.0
  %5140 = vmatpush1.msra.mxu0 0.0
  %5141 = vmatprep.subr.mxu0 0.0
  %5142 = vmatpush1.msra.mxu0 0.0
  %5143 = vmatprep.subr.mxu0 0.0
  %5144 = vmatpush1.msra.mxu0 0.0
  %5145 = vmatprep.subr.mxu0 0.0
  %5146 = vmatpush1.msra.mxu0 0.0
  %5147 = vmatprep.subr.mxu0 0.0
  %5148 = vmatpush1.msra.mxu0 0.0
  %5149 = vmatprep.subr.mxu0 0.0
  %5150 = vmatpush1.msra.mxu0 0.0
  %5151 = vmatprep.subr.mxu0 0.0
  %5152 = vmatpush1.msra.mxu0 0.0
  %5153 = vmatprep.subr.mxu0 0.0
  %5154 = vmatpush1.msra.mxu0 0.0
  %5155 = vmatprep.subr.mxu0 0.0
  %5156 = vmatpush1.msra.mxu0 0.0
  %5157 = vmatprep.subr.mxu0 0.0
  %5158 = vmatpush1.msra.mxu0 0.0
  %5159 = vmatprep.subr.mxu0 0.0
  %5160 = vmatpush1.msra.mxu0 0.0
  %5161 = vmatprep.subr.mxu0 0.0
  %5162 = vmatpush1.msra.mxu0 0.0
  %5163 = vmatprep.subr.mxu0 0.0
  %5164 = vmatpush1.msra.mxu0 %v5131
  %5165 = vmatprep.subr.mxu0 0.0
  %5166 = vmatpush2.msra.mxu0 0.0
  %5167 = vmatprep.subr.mxu0 0.0
  %5168 = vmatpush2.msra.mxu0 0.0
  %5169 = vmatprep.subr.mxu0 0.0
  %5170 = vmatpush2.msra.mxu0 0.0
  %5171 = vmatprep.subr.mxu0 0.0
  %5172 = vmatpush2.msra.mxu0 0.0
  %5173 = vmatprep.subr.mxu0 0.0
  %5174 = vmatpush2.msra.mxu0 0.0
  %5175 = vmatprep.subr.mxu0 0.0
  %5176 = vmatpush2.msra.mxu0 0.0
  %5177 = vmatprep.subr.mxu0 0.0
  %5178 = vmatpush2.msra.mxu0 0.0
  %5179 = vmatprep.subr.mxu0 0.0
  %5180 = vmatpush2.msra.mxu0 0.0
  %5181 = vmatprep.subr.mxu0 0.0
  %5182 = vmatpush2.msra.mxu0 0.0
  %5183 = vmatprep.subr.mxu0 0.0
  %5184 = vmatpush2.msra.mxu0 0.0
  %5185 = vmatprep.subr.mxu0 0.0
  %5186 = vmatpush2.msra.mxu0 0.0
  %5187 = vmatprep.subr.mxu0 0.0
  %5188 = vmatpush2.msra.mxu0 0.0
  %5189 = vmatprep.subr.mxu0 0.0
  %5190 = vmatpush2.msra.mxu0 0.0
  %5191 = vmatprep.subr.mxu0 0.0
  %5192 = vmatpush2.msra.mxu0 0.0
  %5193 = vmatprep.subr.mxu0 0.0
  %5194 = vmatpush2.msra.mxu0 0.0
  %5195 = vmatprep.subr.mxu0 0.0
  %5196 = vmatpush2.msra.mxu0 0.0
  %5197 = vmatprep.mubr.f32.mxu0 0.0
  %5198 = vmatmul.mubr.f32.gmra.mxu0 %v4939
  %v5199 = vpop.f32.mrf.mxu0
  %v5200 = vadd.f32 0.0, %v5199
  %v5201 = vpop.f32.mrf.mxu0
  %5202 = vmatprep.mubr.f32.mxu0 0.0
  %5203 = vmatmul.mubr.f32.gmra.mxu0 %v4942
  %v5204 = vpop.f32.mrf.mxu0
  %v5205 = vadd.f32 0.0, %v5204
  %v5206 = vpop.f32.mrf.mxu0
  %5207 = vmatprep.mubr.f32.mxu0 0.0
  %5208 = vmatmul.mubr.f32.gmra.mxu0 %v4945
  %v5209 = vpop.f32.mrf.mxu0
  %v5210 = vadd.f32 0.0, %v5209
  %v5211 = vpop.f32.mrf.mxu0
  %5212 = vmatprep.mubr.f32.mxu0 0.0
  %5213 = vmatmul.mubr.f32.gmra.mxu0 %v4948
  %v5214 = vpop.f32.mrf.mxu0
  %v5215 = vadd.f32 0.0, %v5214
  %v5216 = vpop.f32.mrf.mxu0
  %5217 = vmatprep.mubr.f32.mxu0 0.0
  %5218 = vmatmul.mubr.f32.gmra.mxu0 %v4951
  %v5219 = vpop.f32.mrf.mxu0
  %v5220 = vadd.f32 0.0, %v5219
  %v5221 = vpop.f32.mrf.mxu0
  %5222 = vmatprep.mubr.f32.mxu0 0.0
  %5223 = vmatmul.mubr.f32.gmra.mxu0 %v4954
  %v5224 = vpop.f32.mrf.mxu0
  %v5225 = vadd.f32 0.0, %v5224
  %v5226 = vpop.f32.mrf.mxu0
  %5227 = vmatprep.mubr.f32.mxu0 0.0
  %5228 = vmatmul.mubr.f32.gmra.mxu0 %v4957
  %v5229 = vpop.f32.mrf.mxu0
  %v5230 = vadd.f32 0.0, %v5229
  %v5231 = vpop.f32.mrf.mxu0
  %5232 = vmatprep.mubr.f32.mxu0 0.0
  %5233 = vmatmul.mubr.f32.gmra.mxu0 %v4960
  %v5234 = vpop.f32.mrf.mxu0
  %v5235 = vadd.f32 0.0, %v5234
  %v5236 = vpop.f32.mrf.mxu0
  %5237 = vmatprep.mubr.f32.mxu0 0.0
  %5238 = vmatmul.mubr.f32.gmra.mxu0 %v4963
  %v5239 = vpop.f32.mrf.mxu0
  %v5240 = vadd.f32 0.0, %v5239
  %v5241 = vpop.f32.mrf.mxu0
  %5242 = vmatprep.mubr.f32.mxu0 0.0
  %5243 = vmatmul.mubr.f32.gmra.mxu0 %v4966
  %v5244 = vpop.f32.mrf.mxu0
  %v5245 = vadd.f32 0.0, %v5244
  %v5246 = vpop.f32.mrf.mxu0
  %5247 = vmatprep.mubr.f32.mxu0 0.0
  %5248 = vmatmul.mubr.f32.gmra.mxu0 %v4969
  %v5249 = vpop.f32.mrf.mxu0
  %v5250 = vadd.f32 0.0, %v5249
  %v5251 = vpop.f32.mrf.mxu0
  %5252 = vmatprep.mubr.f32.mxu0 0.0
  %5253 = vmatmul.mubr.f32.gmra.mxu0 %v4972
  %v5254 = vpop.f32.mrf.mxu0
  %v5255 = vadd.f32 0.0, %v5254
  %v5256 = vpop.f32.mrf.mxu0
  %5257 = vmatprep.mubr.f32.mxu0 0.0
  %5258 = vmatmul.mubr.f32.gmra.mxu0 %v4975
  %v5259 = vpop.f32.mrf.mxu0
  %v5260 = vadd.f32 0.0, %v5259
  %v5261 = vpop.f32.mrf.mxu0
  %5262 = vmatprep.mubr.f32.mxu0 0.0
  %5263 = vmatmul.mubr.f32.gmra.mxu0 %v4978
  %v5264 = vpop.f32.mrf.mxu0
  %v5265 = vadd.f32 0.0, %v5264
  %v5266 = vpop.f32.mrf.mxu0
  %5267 = vmatprep.mubr.f32.mxu0 0.0
  %5268 = vmatmul.mubr.f32.gmra.mxu0 %v4981
  %v5269 = vpop.f32.mrf.mxu0
  %v5270 = vadd.f32 0.0, %v5269
  %v5271 = vpop.f32.mrf.mxu0
  %5272 = vmatprep.mubr.f32.mxu0 0.0
  %5273 = vmatmul.mubr.f32.gmra.mxu0 %v4984
  %v5274 = vpop.f32.mrf.mxu0
  %v5275 = vadd.f32 0.0, %v5274
  %v5276 = vpop.f32.mrf.mxu0
  %5277 = vmatprep.mubr.f32.mxu0 0.0
  %5278 = vmatmul.mubr.f32.gmra.mxu0 %v4987
  %v5279 = vpop.f32.mrf.mxu0
  %v5280 = vadd.f32 0.0, %v5279
  %v5281 = vpop.f32.mrf.mxu0
  %5282 = vmatprep.mubr.f32.mxu0 0.0
  %5283 = vmatmul.mubr.f32.gmra.mxu0 %v4990
  %v5284 = vpop.f32.mrf.mxu0
  %v5285 = vadd.f32 0.0, %v5284
  %v5286 = vpop.f32.mrf.mxu0
  %5287 = vmatprep.mubr.f32.mxu0 0.0
  %5288 = vmatmul.mubr.f32.gmra.mxu0 %v4993
  %v5289 = vpop.f32.mrf.mxu0
  %v5290 = vadd.f32 0.0, %v5289
  %v5291 = vpop.f32.mrf.mxu0
  %5292 = vmatprep.mubr.f32.mxu0 0.0
  %5293 = vmatmul.mubr.f32.gmra.mxu0 %v4996
  %v5294 = vpop.f32.mrf.mxu0
  %v5295 = vadd.f32 0.0, %v5294
  %v5296 = vpop.f32.mrf.mxu0
  %5297 = vmatprep.mubr.f32.mxu0 0.0
  %5298 = vmatmul.mubr.f32.gmra.mxu0 %v4999
  %v5299 = vpop.f32.mrf.mxu0
  %v5300 = vadd.f32 0.0, %v5299
  %v5301 = vpop.f32.mrf.mxu0
  %5302 = vmatprep.mubr.f32.mxu0 0.0
  %5303 = vmatmul.mubr.f32.gmra.mxu0 %v5002
  %v5304 = vpop.f32.mrf.mxu0
  %v5305 = vadd.f32 0.0, %v5304
  %v5306 = vpop.f32.mrf.mxu0
  %5307 = vmatprep.mubr.f32.mxu0 0.0
  %5308 = vmatmul.mubr.f32.gmra.mxu0 %v5005
  %v5309 = vpop.f32.mrf.mxu0
  %v5310 = vadd.f32 0.0, %v5309
  %v5311 = vpop.f32.mrf.mxu0
  %5312 = vmatprep.mubr.f32.mxu0 0.0
  %5313 = vmatmul.mubr.f32.gmra.mxu0 %v5008
  %v5314 = vpop.f32.mrf.mxu0
  %v5315 = vadd.f32 0.0, %v5314
  %v5316 = vpop.f32.mrf.mxu0
  %5317 = vmatprep.mubr.f32.mxu0 0.0
  %5318 = vmatmul.mubr.f32.gmra.mxu0 %v5011
  %v5319 = vpop.f32.mrf.mxu0
  %v5320 = vadd.f32 0.0, %v5319
  %v5321 = vpop.f32.mrf.mxu0
  %5322 = vmatprep.mubr.f32.mxu0 0.0
  %5323 = vmatmul.mubr.f32.gmra.mxu0 %v5014
  %v5324 = vpop.f32.mrf.mxu0
  %v5325 = vadd.f32 0.0, %v5324
  %v5326 = vpop.f32.mrf.mxu0
  %5327 = vmatprep.mubr.f32.mxu0 0.0
  %5328 = vmatmul.mubr.f32.gmra.mxu0 %v5017
  %v5329 = vpop.f32.mrf.mxu0
  %v5330 = vadd.f32 0.0, %v5329
  %v5331 = vpop.f32.mrf.mxu0
  %5332 = vmatprep.mubr.f32.mxu0 0.0
  %5333 = vmatmul.mubr.f32.gmra.mxu0 %v5020
  %v5334 = vpop.f32.mrf.mxu0
  %v5335 = vadd.f32 0.0, %v5334
  %v5336 = vpop.f32.mrf.mxu0
  %5337 = vmatprep.mubr.f32.mxu0 0.0
  %5338 = vmatmul.mubr.f32.gmra.mxu0 %v5023
  %v5339 = vpop.f32.mrf.mxu0
  %v5340 = vadd.f32 0.0, %v5339
  %v5341 = vpop.f32.mrf.mxu0
  %5342 = vmatprep.mubr.f32.mxu0 0.0
  %5343 = vmatmul.mubr.f32.gmra.mxu0 %v5026
  %v5344 = vpop.f32.mrf.mxu0
  %v5345 = vadd.f32 0.0, %v5344
  %v5346 = vpop.f32.mrf.mxu0
  %5347 = vmatprep.mubr.f32.mxu0 0.0
  %5348 = vmatmul.mubr.f32.gmra.mxu0 %v5029
  %v5349 = vpop.f32.mrf.mxu0
  %v5350 = vadd.f32 0.0, %v5349
  %v5351 = vpop.f32.mrf.mxu0
  %5352 = vmatprep.mubr.f32.mxu0 0.0
  %5353 = vmatmul.mubr.f32.gmra.mxu0 %v5032
  %v5354 = vpop.f32.mrf.mxu0
  %v5355 = vadd.f32 0.0, %v5354
  %v5356 = vpop.f32.mrf.mxu0
  %5357 = vmatprep.mubr.f32.mxu0 0.0
  %5358 = vmatmul.mubr.f32.gmra.mxu0 %v5035
  %v5359 = vpop.f32.mrf.mxu0
  %v5360 = vadd.f32 0.0, %v5359
  %v5361 = vpop.f32.mrf.mxu0
  %5362 = vmatprep.mubr.f32.mxu0 0.0
  %5363 = vmatmul.mubr.f32.gmra.mxu0 %v5038
  %v5364 = vpop.f32.mrf.mxu0
  %v5365 = vadd.f32 0.0, %v5364
  %v5366 = vpop.f32.mrf.mxu0
  %5367 = vmatprep.mubr.f32.mxu0 0.0
  %5368 = vmatmul.mubr.f32.gmra.mxu0 %v5041
  %v5369 = vpop.f32.mrf.mxu0
  %v5370 = vadd.f32 0.0, %v5369
  %v5371 = vpop.f32.mrf.mxu0
  %5372 = vmatprep.mubr.f32.mxu0 0.0
  %5373 = vmatmul.mubr.f32.gmra.mxu0 %v5044
  %v5374 = vpop.f32.mrf.mxu0
  %v5375 = vadd.f32 0.0, %v5374
  %v5376 = vpop.f32.mrf.mxu0
  %5377 = vmatprep.mubr.f32.mxu0 0.0
  %5378 = vmatmul.mubr.f32.gmra.mxu0 %v5047
  %v5379 = vpop.f32.mrf.mxu0
  %v5380 = vadd.f32 0.0, %v5379
  %v5381 = vpop.f32.mrf.mxu0
  %5382 = vmatprep.mubr.f32.mxu0 0.0
  %5383 = vmatmul.mubr.f32.gmra.mxu0 %v5050
  %v5384 = vpop.f32.mrf.mxu0
  %v5385 = vadd.f32 0.0, %v5384
  %v5386 = vpop.f32.mrf.mxu0
  %5387 = vmatprep.mubr.f32.mxu0 0.0
  %5388 = vmatmul.mubr.f32.gmra.mxu0 %v5053
  %v5389 = vpop.f32.mrf.mxu0
  %v5390 = vadd.f32 0.0, %v5389
  %v5391 = vpop.f32.mrf.mxu0
  %5392 = vmatprep.mubr.f32.mxu0 0.0
  %5393 = vmatmul.mubr.f32.gmra.mxu0 %v5056
  %v5394 = vpop.f32.mrf.mxu0
  %v5395 = vadd.f32 0.0, %v5394
  %v5396 = vpop.f32.mrf.mxu0
  %5397 = vmatprep.mubr.f32.mxu0 0.0
  %5398 = vmatmul.mubr.f32.gmra.mxu0 %v5059
  %v5399 = vpop.f32.mrf.mxu0
  %v5400 = vadd.f32 0.0, %v5399
  %v5401 = vpop.f32.mrf.mxu0
  %5402 = vmatprep.mubr.f32.mxu0 0.0
  %5403 = vmatmul.mubr.f32.gmra.mxu0 %v5062
  %v5404 = vpop.f32.mrf.mxu0
  %v5405 = vadd.f32 0.0, %v5404
  %v5406 = vpop.f32.mrf.mxu0
  %5407 = vmatprep.mubr.f32.mxu0 0.0
  %5408 = vmatmul.mubr.f32.gmra.mxu0 %v5065
  %v5409 = vpop.f32.mrf.mxu0
  %v5410 = vadd.f32 0.0, %v5409
  %v5411 = vpop.f32.mrf.mxu0
  %5412 = vmatprep.mubr.f32.mxu0 0.0
  %5413 = vmatmul.mubr.f32.gmra.mxu0 %v5068
  %v5414 = vpop.f32.mrf.mxu0
  %v5415 = vadd.f32 0.0, %v5414
  %v5416 = vpop.f32.mrf.mxu0
  %5417 = vmatprep.mubr.f32.mxu0 0.0
  %5418 = vmatmul.mubr.f32.gmra.mxu0 %v5071
  %v5419 = vpop.f32.mrf.mxu0
  %v5420 = vadd.f32 0.0, %v5419
  %v5421 = vpop.f32.mrf.mxu0
  %5422 = vmatprep.mubr.f32.mxu0 0.0
  %5423 = vmatmul.mubr.f32.gmra.mxu0 %v5074
  %v5424 = vpop.f32.mrf.mxu0
  %v5425 = vadd.f32 0.0, %v5424
  %v5426 = vpop.f32.mrf.mxu0
  %5427 = vmatprep.mubr.f32.mxu0 0.0
  %5428 = vmatmul.mubr.f32.gmra.mxu0 %v5077
  %v5429 = vpop.f32.mrf.mxu0
  %v5430 = vadd.f32 0.0, %v5429
  %v5431 = vpop.f32.mrf.mxu0
  %5432 = vmatprep.mubr.f32.mxu0 0.0
  %5433 = vmatmul.mubr.f32.gmra.mxu0 %v5080
  %v5434 = vpop.f32.mrf.mxu0
  %v5435 = vadd.f32 0.0, %v5434
  %v5436 = vpop.f32.mrf.mxu0
  %5437 = vmatprep.mubr.f32.mxu0 0.0
  %5438 = vmatmul.mubr.f32.gmra.mxu0 %v5083
  %v5439 = vpop.f32.mrf.mxu0
  %v5440 = vadd.f32 0.0, %v5439
  %v5441 = vpop.f32.mrf.mxu0
  %5442 = vmatprep.mubr.f32.mxu0 0.0
  %5443 = vmatmul.mubr.f32.gmra.mxu0 %v5086
  %v5444 = vpop.f32.mrf.mxu0
  %v5445 = vadd.f32 0.0, %v5444
  %v5446 = vpop.f32.mrf.mxu0
  %5447 = vmatprep.mubr.f32.mxu0 0.0
  %5448 = vmatmul.mubr.f32.gmra.mxu0 %v5089
  %v5449 = vpop.f32.mrf.mxu0
  %v5450 = vadd.f32 0.0, %v5449
  %v5451 = vpop.f32.mrf.mxu0
  %5452 = vmatprep.mubr.f32.mxu0 0.0
  %5453 = vmatmul.mubr.f32.gmra.mxu0 %v5092
  %v5454 = vpop.f32.mrf.mxu0
  %v5455 = vadd.f32 0.0, %v5454
  %v5456 = vpop.f32.mrf.mxu0
  %5457 = vmatprep.mubr.f32.mxu0 0.0
  %5458 = vmatmul.mubr.f32.gmra.mxu0 %v5095
  %v5459 = vpop.f32.mrf.mxu0
  %v5460 = vadd.f32 0.0, %v5459
  %v5461 = vpop.f32.mrf.mxu0
  %5462 = vmatprep.mubr.f32.mxu0 0.0
  %5463 = vmatmul.mubr.f32.gmra.mxu0 %v5098
  %v5464 = vpop.f32.mrf.mxu0
  %v5465 = vadd.f32 0.0, %v5464
  %v5466 = vpop.f32.mrf.mxu0
  %5467 = vmatprep.mubr.f32.mxu0 0.0
  %5468 = vmatmul.mubr.f32.gmra.mxu0 %v5101
  %v5469 = vpop.f32.mrf.mxu0
  %v5470 = vadd.f32 0.0, %v5469
  %v5471 = vpop.f32.mrf.mxu0
  %5472 = vmatprep.mubr.f32.mxu0 0.0
  %5473 = vmatmul.mubr.f32.gmra.mxu0 %v5104
  %v5474 = vpop.f32.mrf.mxu0
  %v5475 = vadd.f32 0.0, %v5474
  %v5476 = vpop.f32.mrf.mxu0
  %5477 = vmatprep.mubr.f32.mxu0 0.0
  %5478 = vmatmul.mubr.f32.gmra.mxu0 %v5107
  %v5479 = vpop.f32.mrf.mxu0
  %v5480 = vadd.f32 0.0, %v5479
  %v5481 = vpop.f32.mrf.mxu0
  %5482 = vmatprep.mubr.f32.mxu0 0.0
  %5483 = vmatmul.mubr.f32.gmra.mxu0 %v5110
  %v5484 = vpop.f32.mrf.mxu0
  %v5485 = vadd.f32 0.0, %v5484
  %v5486 = vpop.f32.mrf.mxu0
  %5487 = vmatprep.mubr.f32.mxu0 0.0
  %5488 = vmatmul.mubr.f32.gmra.mxu0 %v5113
  %v5489 = vpop.f32.mrf.mxu0
  %v5490 = vadd.f32 0.0, %v5489
  %v5491 = vpop.f32.mrf.mxu0
  %5492 = vmatprep.mubr.f32.mxu0 0.0
  %5493 = vmatmul.mubr.f32.gmra.mxu0 %v5116
  %v5494 = vpop.f32.mrf.mxu0
  %v5495 = vadd.f32 0.0, %v5494
  %v5496 = vpop.f32.mrf.mxu0
  %5497 = vmatprep.mubr.f32.mxu0 0.0
  %5498 = vmatmul.mubr.f32.gmra.mxu0 %v5119
  %v5499 = vpop.f32.mrf.mxu0
  %v5500 = vadd.f32 0.0, %v5499
  %v5501 = vpop.f32.mrf.mxu0
  %5502 = vmatprep.mubr.f32.mxu0 0.0
  %5503 = vmatmul.mubr.f32.gmra.mxu0 %v5122
  %v5504 = vpop.f32.mrf.mxu0
  %v5505 = vadd.f32 0.0, %v5504
  %v5506 = vpop.f32.mrf.mxu0
  %5507 = vmatprep.mubr.f32.mxu0 0.0
  %5508 = vmatmul.mubr.f32.gmra.mxu0 %v5125
  %v5509 = vpop.f32.mrf.mxu0
  %v5510 = vadd.f32 0.0, %v5509
  %v5511 = vpop.f32.mrf.mxu0
  %5512 = vmatprep.mubr.f32.mxu0 0.0
  %5513 = vmatmul.mubr.f32.gmra.mxu0 %v5128
  %v5514 = vpop.f32.mrf.mxu0
  %v5515 = vadd.f32 0.0, %v5514
  %v5516 = vpop.f32.mrf.mxu0
  %5517 = vdwg.mxu0
  %v5518 = vadd.f32 %v4808, %v5200
  %v5519 = vadd.f32 %v4809, %v5205
  %v5520 = vadd.f32 %v4810, %v5210
  %v5521 = vadd.f32 %v4811, %v5215
  %v5522 = vadd.f32 %v4812, %v5220
  %v5523 = vadd.f32 %v4813, %v5225
  %v5524 = vadd.f32 %v4814, %v5230
  %v5525 = vadd.f32 %v4815, %v5235
  %v5526 = vadd.f32 %v4816, %v5240
  %v5527 = vadd.f32 %v4817, %v5245
  %v5528 = vadd.f32 %v4818, %v5250
  %v5529 = vadd.f32 %v4819, %v5255
  %v5530 = vadd.f32 %v4820, %v5260
  %v5531 = vadd.f32 %v4821, %v5265
  %v5532 = vadd.f32 %v4822, %v5270
  %v5533 = vadd.f32 %v4823, %v5275
  %v5534 = vadd.f32 %v4824, %v5280
  %v5535 = vadd.f32 %v4825, %v5285
  %v5536 = vadd.f32 %v4826, %v5290
  %v5537 = vadd.f32 %v4827, %v5295
  %v5538 = vadd.f32 %v4828, %v5300
  %v5539 = vadd.f32 %v4829, %v5305
  %v5540 = vadd.f32 %v4830, %v5310
  %v5541 = vadd.f32 %v4831, %v5315
  %v5542 = vadd.f32 %v4832, %v5320
  %v5543 = vadd.f32 %v4833, %v5325
  %v5544 = vadd.f32 %v4834, %v5330
  %v5545 = vadd.f32 %v4835, %v5335
  %v5546 = vadd.f32 %v4836, %v5340
  %v5547 = vadd.f32 %v4837, %v5345
  %v5548 = vadd.f32 %v4838, %v5350
  %v5549 = vadd.f32 %v4839, %v5355
  %v5550 = vadd.f32 %v4840, %v5360
  %v5551 = vadd.f32 %v4841, %v5365
  %v5552 = vadd.f32 %v4842, %v5370
  %v5553 = vadd.f32 %v4843, %v5375
  %v5554 = vadd.f32 %v4844, %v5380
  %v5555 = vadd.f32 %v4845, %v5385
  %v5556 = vadd.f32 %v4846, %v5390
  %v5557 = vadd.f32 %v4847, %v5395
  %v5558 = vadd.f32 %v4848, %v5400
  %v5559 = vadd.f32 %v4849, %v5405
  %v5560 = vadd.f32 %v4850, %v5410
  %v5561 = vadd.f32 %v4851, %v5415
  %v5562 = vadd.f32 %v4852, %v5420
  %v5563 = vadd.f32 %v4853, %v5425
  %v5564 = vadd.f32 %v4854, %v5430
  %v5565 = vadd.f32 %v4855, %v5435
  %v5566 = vadd.f32 %v4856, %v5440
  %v5567 = vadd.f32 %v4857, %v5445
  %v5568 = vadd.f32 %v4858, %v5450
  %v5569 = vadd.f32 %v4859, %v5455
  %v5570 = vadd.f32 %v4860, %v5460
  %v5571 = vadd.f32 %v4861, %v5465
  %v5572 = vadd.f32 %v4862, %v5470
  %v5573 = vadd.f32 %v4863, %v5475
  %v5574 = vadd.f32 %v4864, %v5480
  %v5575 = vadd.f32 %v4865, %v5485
  %v5576 = vadd.f32 %v4866, %v5490
  %v5577 = vadd.f32 %v4867, %v5495
  %v5578 = vadd.f32 %v4868, %v5500
  %v5579 = vadd.f32 %v4869, %v5505
  %v5580 = vadd.f32 %v4870, %v5510
  %v5581 = vadd.f32 %v4871, %v5515
  %v5582 = vld [vmem:[%s4161 + $0x2] sm:$0xff]
  %v5583 = vld [vmem:[%s4161 + $0xa] sm:$0xff]
  %v5584 = vld [vmem:[%s4161 + $0x1a] sm:$0xff]
  %v5585 = vld [vmem:[%s4161 + $0x22] sm:$0xff]
  %v5586 = vld [vmem:[%s4161 + $0x32] sm:$0xff]
  %v5587 = vld [vmem:[%s4161 + $0x3a] sm:$0xff]
  %v5588 = vld [vmem:[%s4161 + $0x4a] sm:$0xff]
  %v5589 = vld [vmem:[%s4161 + $0x52] sm:$0xff]
  %v5590 = vld [vmem:[%s4161 + $0x62] sm:$0xff]
  %v5591 = vld [vmem:[%s4161 + $0x6a] sm:$0xff]
  %v5592 = vld [vmem:[%s4161 + $0x7a] sm:$0xff]
  %v5593 = vld [vmem:[%s4161 + $0x82] sm:$0xff]
  %v5594 = vld [vmem:[%s4161 + $0x92] sm:$0xff]
  %v5595 = vld [vmem:[%s4161 + $0x9a] sm:$0xff]
  %v5596 = vld [vmem:[%s4161 + $0xaa] sm:$0xff]
  %v5597 = vld [vmem:[%s4161 + $0xb2] sm:$0xff]
  %v5598 = vld [vmem:[%s4161 + $0xc2] sm:$0xff]
  %v5599 = vld [vmem:[%s4161 + $0xca] sm:$0xff]
  %v5600 = vld [vmem:[%s4161 + $0xda] sm:$0xff]
  %v5601 = vld [vmem:[%s4161 + $0xe2] sm:$0xff]
  %v5602 = vld [vmem:[%s4161 + $0xf2] sm:$0xff]
  %v5603 = vld [vmem:[%s4161 + $0xfa] sm:$0xff]
  %v5604 = vld [vmem:[%s4161 + $0x10a] sm:$0xff]
  %v5605 = vld [vmem:[%s4161 + $0x112] sm:$0xff]
  %v5606 = vld [vmem:[%s4161 + $0x122] sm:$0xff]
  %v5607 = vld [vmem:[%s4161 + $0x12a] sm:$0xff]
  %v5608 = vld [vmem:[%s4161 + $0x13a] sm:$0xff]
  %v5609 = vld [vmem:[%s4161 + $0x142] sm:$0xff]
  %v5610 = vld [vmem:[%s4161 + $0x152] sm:$0xff]
  %v5611 = vld [vmem:[%s4161 + $0x15a] sm:$0xff]
  %v5612 = vld [vmem:[%s4161 + $0x16a] sm:$0xff]
  %v5613 = vld [vmem:[%s4161 + $0x172] sm:$0xff]
  %v5614 = vld [vmem:[%s4161 + $0x1b2] sm:$0xff]
  %v5615 = vld [vmem:[%s4161 + $0x1ba] sm:$0xff]
  %v5616 = vld [vmem:[%s4161 + $0x1ca] sm:$0xff]
  %v5617 = vld [vmem:[%s4161 + $0x1d2] sm:$0xff]
  %v5618 = vld [vmem:[%s4161 + $0x1e2] sm:$0xff]
  %v5619 = vld [vmem:[%s4161 + $0x1ea] sm:$0xff]
  %v5620 = vld [vmem:[%s4161 + $0x1fa] sm:$0xff]
  %v5621 = vld [vmem:[%s4161 + $0x202] sm:$0xff]
  %v5622 = vld [vmem:[%s4161 + $0x212] sm:$0xff]
  %v5623 = vld [vmem:[%s4161 + $0x21a] sm:$0xff]
  %v5624 = vld [vmem:[%s4161 + $0x22a] sm:$0xff]
  %v5625 = vld [vmem:[%s4161 + $0x232] sm:$0xff]
  %v5626 = vld [vmem:[%s4161 + $0x242] sm:$0xff]
  %v5627 = vld [vmem:[%s4161 + $0x24a] sm:$0xff]
  %v5628 = vld [vmem:[%s4161 + $0x25a] sm:$0xff]
  %v5629 = vld [vmem:[%s4161 + $0x262] sm:$0xff]
  %v5630 = vld [vmem:[%s4161 + $0x272] sm:$0xff]
  %v5631 = vld [vmem:[%s4161 + $0x27a] sm:$0xff]
  %v5632 = vld [vmem:[%s4161 + $0x28a] sm:$0xff]
  %v5633 = vld [vmem:[%s4161 + $0x292] sm:$0xff]
  %v5634 = vld [vmem:[%s4161 + $0x2a2] sm:$0xff]
  %v5635 = vld [vmem:[%s4161 + $0x2aa] sm:$0xff]
  %v5636 = vld [vmem:[%s4161 + $0x2ba] sm:$0xff]
  %v5637 = vld [vmem:[%s4161 + $0x2c2] sm:$0xff]
  %v5638 = vld [vmem:[%s4161 + $0x2d2] sm:$0xff]
  %v5639 = vld [vmem:[%s4161 + $0x2da] sm:$0xff]
  %v5640 = vld [vmem:[%s4161 + $0x2ea] sm:$0xff]
  %v5641 = vld [vmem:[%s4161 + $0x2f2] sm:$0xff]
  %v5642 = vld [vmem:[%s4161 + $0x302] sm:$0xff]
  %v5643 = vld [vmem:[%s4161 + $0x30a] sm:$0xff]
  %v5644 = vld [vmem:[%s4161 + $0x31a] sm:$0xff]
  %v5645 = vld [vmem:[%s4161 + $0x322] sm:$0xff]
  %s5646 = scalar_lea.vmem %s1, 32
  %v5647 = vld [vmem:[%s5646] sm:$0xf]
  %v5649 = vsel %vm158, %v5582, 0
  %v5652 = vsel %vm158, %v5583, 0
  %v5655 = vsel %vm158, %v5584, 0
  %v5658 = vsel %vm158, %v5585, 0
  %v5661 = vsel %vm158, %v5586, 0
  %v5664 = vsel %vm158, %v5587, 0
  %v5667 = vsel %vm158, %v5588, 0
  %v5670 = vsel %vm158, %v5589, 0
  %v5673 = vsel %vm158, %v5590, 0
  %v5676 = vsel %vm158, %v5591, 0
  %v5679 = vsel %vm158, %v5592, 0
  %v5682 = vsel %vm158, %v5593, 0
  %v5685 = vsel %vm158, %v5594, 0
  %v5688 = vsel %vm158, %v5595, 0
  %v5691 = vsel %vm158, %v5596, 0
  %v5694 = vsel %vm158, %v5597, 0
  %v5697 = vsel %vm158, %v5598, 0
  %v5700 = vsel %vm158, %v5599, 0
  %v5703 = vsel %vm158, %v5600, 0
  %v5706 = vsel %vm158, %v5601, 0
  %v5709 = vsel %vm158, %v5602, 0
  %v5712 = vsel %vm158, %v5603, 0
  %v5715 = vsel %vm158, %v5604, 0
  %v5718 = vsel %vm158, %v5605, 0
  %v5721 = vsel %vm158, %v5606, 0
  %v5724 = vsel %vm158, %v5607, 0
  %v5727 = vsel %vm158, %v5608, 0
  %v5730 = vsel %vm158, %v5609, 0
  %v5733 = vsel %vm158, %v5610, 0
  %v5736 = vsel %vm158, %v5611, 0
  %v5739 = vsel %vm158, %v5612, 0
  %v5742 = vsel %vm158, %v5613, 0
  %v5745 = vsel %vm158, %v5614, 0
  %v5748 = vsel %vm158, %v5615, 0
  %v5751 = vsel %vm158, %v5616, 0
  %v5754 = vsel %vm158, %v5617, 0
  %v5757 = vsel %vm158, %v5618, 0
  %v5760 = vsel %vm158, %v5619, 0
  %v5763 = vsel %vm158, %v5620, 0
  %v5766 = vsel %vm158, %v5621, 0
  %v5769 = vsel %vm158, %v5622, 0
  %v5772 = vsel %vm158, %v5623, 0
  %v5775 = vsel %vm158, %v5624, 0
  %v5778 = vsel %vm158, %v5625, 0
  %v5781 = vsel %vm158, %v5626, 0
  %v5784 = vsel %vm158, %v5627, 0
  %v5787 = vsel %vm158, %v5628, 0
  %v5790 = vsel %vm158, %v5629, 0
  %v5793 = vsel %vm158, %v5630, 0
  %v5796 = vsel %vm158, %v5631, 0
  %v5799 = vsel %vm158, %v5632, 0
  %v5802 = vsel %vm158, %v5633, 0
  %v5805 = vsel %vm158, %v5634, 0
  %v5808 = vsel %vm158, %v5635, 0
  %v5811 = vsel %vm158, %v5636, 0
  %v5814 = vsel %vm158, %v5637, 0
  %v5817 = vsel %vm158, %v5638, 0
  %v5820 = vsel %vm158, %v5639, 0
  %v5823 = vsel %vm158, %v5640, 0
  %v5826 = vsel %vm158, %v5641, 0
  %v5829 = vsel %vm158, %v5642, 0
  %v5832 = vsel %vm158, %v5643, 0
  %v5835 = vsel %vm158, %v5644, 0
  %v5838 = vsel %vm158, %v5645, 0
  %v5841 = vsel %vm351, %v5647, 0
  %5843 = vmatprep.subr.mxu0 0.0
  %5844 = vmatpush1.msra.mxu0 0.0
  %5845 = vmatprep.subr.mxu0 0.0
  %5846 = vmatpush1.msra.mxu0 0.0
  %5847 = vmatprep.subr.mxu0 0.0
  %5848 = vmatpush1.msra.mxu0 0.0
  %5849 = vmatprep.subr.mxu0 0.0
  %5850 = vmatpush1.msra.mxu0 0.0
  %5851 = vmatprep.subr.mxu0 0.0
  %5852 = vmatpush1.msra.mxu0 0.0
  %5853 = vmatprep.subr.mxu0 0.0
  %5854 = vmatpush1.msra.mxu0 0.0
  %5855 = vmatprep.subr.mxu0 0.0
  %5856 = vmatpush1.msra.mxu0 0.0
  %5857 = vmatprep.subr.mxu0 0.0
  %5858 = vmatpush1.msra.mxu0 0.0
  %5859 = vmatprep.subr.mxu0 0.0
  %5860 = vmatpush1.msra.mxu0 0.0
  %5861 = vmatprep.subr.mxu0 0.0
  %5862 = vmatpush1.msra.mxu0 0.0
  %5863 = vmatprep.subr.mxu0 0.0
  %5864 = vmatpush1.msra.mxu0 0.0
  %5865 = vmatprep.subr.mxu0 0.0
  %5866 = vmatpush1.msra.mxu0 0.0
  %5867 = vmatprep.subr.mxu0 0.0
  %5868 = vmatpush1.msra.mxu0 0.0
  %5869 = vmatprep.subr.mxu0 0.0
  %5870 = vmatpush1.msra.mxu0 0.0
  %5871 = vmatprep.subr.mxu0 0.0
  %5872 = vmatpush1.msra.mxu0 0.0
  %5873 = vmatprep.subr.mxu0 0.0
  %5874 = vmatpush1.msra.mxu0 %v5841
  %5875 = vmatprep.subr.mxu0 0.0
  %5876 = vmatpush2.msra.mxu0 0.0
  %5877 = vmatprep.subr.mxu0 0.0
  %5878 = vmatpush2.msra.mxu0 0.0
  %5879 = vmatprep.subr.mxu0 0.0
  %5880 = vmatpush2.msra.mxu0 0.0
  %5881 = vmatprep.subr.mxu0 0.0
  %5882 = vmatpush2.msra.mxu0 0.0
  %5883 = vmatprep.subr.mxu0 0.0
  %5884 = vmatpush2.msra.mxu0 0.0
  %5885 = vmatprep.subr.mxu0 0.0
  %5886 = vmatpush2.msra.mxu0 0.0
  %5887 = vmatprep.subr.mxu0 0.0
  %5888 = vmatpush2.msra.mxu0 0.0
  %5889 = vmatprep.subr.mxu0 0.0
  %5890 = vmatpush2.msra.mxu0 0.0
  %5891 = vmatprep.subr.mxu0 0.0
  %5892 = vmatpush2.msra.mxu0 0.0
  %5893 = vmatprep.subr.mxu0 0.0
  %5894 = vmatpush2.msra.mxu0 0.0
  %5895 = vmatprep.subr.mxu0 0.0
  %5896 = vmatpush2.msra.mxu0 0.0
  %5897 = vmatprep.subr.mxu0 0.0
  %5898 = vmatpush2.msra.mxu0 0.0
  %5899 = vmatprep.subr.mxu0 0.0
  %5900 = vmatpush2.msra.mxu0 0.0
  %5901 = vmatprep.subr.mxu0 0.0
  %5902 = vmatpush2.msra.mxu0 0.0
  %5903 = vmatprep.subr.mxu0 0.0
  %5904 = vmatpush2.msra.mxu0 0.0
  %5905 = vmatprep.subr.mxu0 0.0
  %5906 = vmatpush2.msra.mxu0 0.0
  %5907 = vmatprep.mubr.f32.mxu0 0.0
  %5908 = vmatmul.mubr.f32.gmra.mxu0 %v5649
  %v5909 = vpop.f32.mrf.mxu0
  %v5910 = vadd.f32 0.0, %v5909
  %v5911 = vpop.f32.mrf.mxu0
  %5912 = vmatprep.mubr.f32.mxu0 0.0
  %5913 = vmatmul.mubr.f32.gmra.mxu0 %v5652
  %v5914 = vpop.f32.mrf.mxu0
  %v5915 = vadd.f32 0.0, %v5914
  %v5916 = vpop.f32.mrf.mxu0
  %5917 = vmatprep.mubr.f32.mxu0 0.0
  %5918 = vmatmul.mubr.f32.gmra.mxu0 %v5655
  %v5919 = vpop.f32.mrf.mxu0
  %v5920 = vadd.f32 0.0, %v5919
  %v5921 = vpop.f32.mrf.mxu0
  %5922 = vmatprep.mubr.f32.mxu0 0.0
  %5923 = vmatmul.mubr.f32.gmra.mxu0 %v5658
  %v5924 = vpop.f32.mrf.mxu0
  %v5925 = vadd.f32 0.0, %v5924
  %v5926 = vpop.f32.mrf.mxu0
  %5927 = vmatprep.mubr.f32.mxu0 0.0
  %5928 = vmatmul.mubr.f32.gmra.mxu0 %v5661
  %v5929 = vpop.f32.mrf.mxu0
  %v5930 = vadd.f32 0.0, %v5929
  %v5931 = vpop.f32.mrf.mxu0
  %5932 = vmatprep.mubr.f32.mxu0 0.0
  %5933 = vmatmul.mubr.f32.gmra.mxu0 %v5664
  %v5934 = vpop.f32.mrf.mxu0
  %v5935 = vadd.f32 0.0, %v5934
  %v5936 = vpop.f32.mrf.mxu0
  %5937 = vmatprep.mubr.f32.mxu0 0.0
  %5938 = vmatmul.mubr.f32.gmra.mxu0 %v5667
  %v5939 = vpop.f32.mrf.mxu0
  %v5940 = vadd.f32 0.0, %v5939
  %v5941 = vpop.f32.mrf.mxu0
  %5942 = vmatprep.mubr.f32.mxu0 0.0
  %5943 = vmatmul.mubr.f32.gmra.mxu0 %v5670
  %v5944 = vpop.f32.mrf.mxu0
  %v5945 = vadd.f32 0.0, %v5944
  %v5946 = vpop.f32.mrf.mxu0
  %5947 = vmatprep.mubr.f32.mxu0 0.0
  %5948 = vmatmul.mubr.f32.gmra.mxu0 %v5673
  %v5949 = vpop.f32.mrf.mxu0
  %v5950 = vadd.f32 0.0, %v5949
  %v5951 = vpop.f32.mrf.mxu0
  %5952 = vmatprep.mubr.f32.mxu0 0.0
  %5953 = vmatmul.mubr.f32.gmra.mxu0 %v5676
  %v5954 = vpop.f32.mrf.mxu0
  %v5955 = vadd.f32 0.0, %v5954
  %v5956 = vpop.f32.mrf.mxu0
  %5957 = vmatprep.mubr.f32.mxu0 0.0
  %5958 = vmatmul.mubr.f32.gmra.mxu0 %v5679
  %v5959 = vpop.f32.mrf.mxu0
  %v5960 = vadd.f32 0.0, %v5959
  %v5961 = vpop.f32.mrf.mxu0
  %5962 = vmatprep.mubr.f32.mxu0 0.0
  %5963 = vmatmul.mubr.f32.gmra.mxu0 %v5682
  %v5964 = vpop.f32.mrf.mxu0
  %v5965 = vadd.f32 0.0, %v5964
  %v5966 = vpop.f32.mrf.mxu0
  %5967 = vmatprep.mubr.f32.mxu0 0.0
  %5968 = vmatmul.mubr.f32.gmra.mxu0 %v5685
  %v5969 = vpop.f32.mrf.mxu0
  %v5970 = vadd.f32 0.0, %v5969
  %v5971 = vpop.f32.mrf.mxu0
  %5972 = vmatprep.mubr.f32.mxu0 0.0
  %5973 = vmatmul.mubr.f32.gmra.mxu0 %v5688
  %v5974 = vpop.f32.mrf.mxu0
  %v5975 = vadd.f32 0.0, %v5974
  %v5976 = vpop.f32.mrf.mxu0
  %5977 = vmatprep.mubr.f32.mxu0 0.0
  %5978 = vmatmul.mubr.f32.gmra.mxu0 %v5691
  %v5979 = vpop.f32.mrf.mxu0
  %v5980 = vadd.f32 0.0, %v5979
  %v5981 = vpop.f32.mrf.mxu0
  %5982 = vmatprep.mubr.f32.mxu0 0.0
  %5983 = vmatmul.mubr.f32.gmra.mxu0 %v5694
  %v5984 = vpop.f32.mrf.mxu0
  %v5985 = vadd.f32 0.0, %v5984
  %v5986 = vpop.f32.mrf.mxu0
  %5987 = vmatprep.mubr.f32.mxu0 0.0
  %5988 = vmatmul.mubr.f32.gmra.mxu0 %v5697
  %v5989 = vpop.f32.mrf.mxu0
  %v5990 = vadd.f32 0.0, %v5989
  %v5991 = vpop.f32.mrf.mxu0
  %5992 = vmatprep.mubr.f32.mxu0 0.0
  %5993 = vmatmul.mubr.f32.gmra.mxu0 %v5700
  %v5994 = vpop.f32.mrf.mxu0
  %v5995 = vadd.f32 0.0, %v5994
  %v5996 = vpop.f32.mrf.mxu0
  %5997 = vmatprep.mubr.f32.mxu0 0.0
  %5998 = vmatmul.mubr.f32.gmra.mxu0 %v5703
  %v5999 = vpop.f32.mrf.mxu0
  %v6000 = vadd.f32 0.0, %v5999
  %v6001 = vpop.f32.mrf.mxu0
  %6002 = vmatprep.mubr.f32.mxu0 0.0
  %6003 = vmatmul.mubr.f32.gmra.mxu0 %v5706
  %v6004 = vpop.f32.mrf.mxu0
  %v6005 = vadd.f32 0.0, %v6004
  %v6006 = vpop.f32.mrf.mxu0
  %6007 = vmatprep.mubr.f32.mxu0 0.0
  %6008 = vmatmul.mubr.f32.gmra.mxu0 %v5709
  %v6009 = vpop.f32.mrf.mxu0
  %v6010 = vadd.f32 0.0, %v6009
  %v6011 = vpop.f32.mrf.mxu0
  %6012 = vmatprep.mubr.f32.mxu0 0.0
  %6013 = vmatmul.mubr.f32.gmra.mxu0 %v5712
  %v6014 = vpop.f32.mrf.mxu0
  %v6015 = vadd.f32 0.0, %v6014
  %v6016 = vpop.f32.mrf.mxu0
  %6017 = vmatprep.mubr.f32.mxu0 0.0
  %6018 = vmatmul.mubr.f32.gmra.mxu0 %v5715
  %v6019 = vpop.f32.mrf.mxu0
  %v6020 = vadd.f32 0.0, %v6019
  %v6021 = vpop.f32.mrf.mxu0
  %6022 = vmatprep.mubr.f32.mxu0 0.0
  %6023 = vmatmul.mubr.f32.gmra.mxu0 %v5718
  %v6024 = vpop.f32.mrf.mxu0
  %v6025 = vadd.f32 0.0, %v6024
  %v6026 = vpop.f32.mrf.mxu0
  %6027 = vmatprep.mubr.f32.mxu0 0.0
  %6028 = vmatmul.mubr.f32.gmra.mxu0 %v5721
  %v6029 = vpop.f32.mrf.mxu0
  %v6030 = vadd.f32 0.0, %v6029
  %v6031 = vpop.f32.mrf.mxu0
  %6032 = vmatprep.mubr.f32.mxu0 0.0
  %6033 = vmatmul.mubr.f32.gmra.mxu0 %v5724
  %v6034 = vpop.f32.mrf.mxu0
  %v6035 = vadd.f32 0.0, %v6034
  %v6036 = vpop.f32.mrf.mxu0
  %6037 = vmatprep.mubr.f32.mxu0 0.0
  %6038 = vmatmul.mubr.f32.gmra.mxu0 %v5727
  %v6039 = vpop.f32.mrf.mxu0
  %v6040 = vadd.f32 0.0, %v6039
  %v6041 = vpop.f32.mrf.mxu0
  %6042 = vmatprep.mubr.f32.mxu0 0.0
  %6043 = vmatmul.mubr.f32.gmra.mxu0 %v5730
  %v6044 = vpop.f32.mrf.mxu0
  %v6045 = vadd.f32 0.0, %v6044
  %v6046 = vpop.f32.mrf.mxu0
  %6047 = vmatprep.mubr.f32.mxu0 0.0
  %6048 = vmatmul.mubr.f32.gmra.mxu0 %v5733
  %v6049 = vpop.f32.mrf.mxu0
  %v6050 = vadd.f32 0.0, %v6049
  %v6051 = vpop.f32.mrf.mxu0
  %6052 = vmatprep.mubr.f32.mxu0 0.0
  %6053 = vmatmul.mubr.f32.gmra.mxu0 %v5736
  %v6054 = vpop.f32.mrf.mxu0
  %v6055 = vadd.f32 0.0, %v6054
  %v6056 = vpop.f32.mrf.mxu0
  %6057 = vmatprep.mubr.f32.mxu0 0.0
  %6058 = vmatmul.mubr.f32.gmra.mxu0 %v5739
  %v6059 = vpop.f32.mrf.mxu0
  %v6060 = vadd.f32 0.0, %v6059
  %v6061 = vpop.f32.mrf.mxu0
  %6062 = vmatprep.mubr.f32.mxu0 0.0
  %6063 = vmatmul.mubr.f32.gmra.mxu0 %v5742
  %v6064 = vpop.f32.mrf.mxu0
  %v6065 = vadd.f32 0.0, %v6064
  %v6066 = vpop.f32.mrf.mxu0
  %6067 = vmatprep.mubr.f32.mxu0 0.0
  %6068 = vmatmul.mubr.f32.gmra.mxu0 %v5745
  %v6069 = vpop.f32.mrf.mxu0
  %v6070 = vadd.f32 0.0, %v6069
  %v6071 = vpop.f32.mrf.mxu0
  %6072 = vmatprep.mubr.f32.mxu0 0.0
  %6073 = vmatmul.mubr.f32.gmra.mxu0 %v5748
  %v6074 = vpop.f32.mrf.mxu0
  %v6075 = vadd.f32 0.0, %v6074
  %v6076 = vpop.f32.mrf.mxu0
  %6077 = vmatprep.mubr.f32.mxu0 0.0
  %6078 = vmatmul.mubr.f32.gmra.mxu0 %v5751
  %v6079 = vpop.f32.mrf.mxu0
  %v6080 = vadd.f32 0.0, %v6079
  %v6081 = vpop.f32.mrf.mxu0
  %6082 = vmatprep.mubr.f32.mxu0 0.0
  %6083 = vmatmul.mubr.f32.gmra.mxu0 %v5754
  %v6084 = vpop.f32.mrf.mxu0
  %v6085 = vadd.f32 0.0, %v6084
  %v6086 = vpop.f32.mrf.mxu0
  %6087 = vmatprep.mubr.f32.mxu0 0.0
  %6088 = vmatmul.mubr.f32.gmra.mxu0 %v5757
  %v6089 = vpop.f32.mrf.mxu0
  %v6090 = vadd.f32 0.0, %v6089
  %v6091 = vpop.f32.mrf.mxu0
  %6092 = vmatprep.mubr.f32.mxu0 0.0
  %6093 = vmatmul.mubr.f32.gmra.mxu0 %v5760
  %v6094 = vpop.f32.mrf.mxu0
  %v6095 = vadd.f32 0.0, %v6094
  %v6096 = vpop.f32.mrf.mxu0
  %6097 = vmatprep.mubr.f32.mxu0 0.0
  %6098 = vmatmul.mubr.f32.gmra.mxu0 %v5763
  %v6099 = vpop.f32.mrf.mxu0
  %v6100 = vadd.f32 0.0, %v6099
  %v6101 = vpop.f32.mrf.mxu0
  %6102 = vmatprep.mubr.f32.mxu0 0.0
  %6103 = vmatmul.mubr.f32.gmra.mxu0 %v5766
  %v6104 = vpop.f32.mrf.mxu0
  %v6105 = vadd.f32 0.0, %v6104
  %v6106 = vpop.f32.mrf.mxu0
  %6107 = vmatprep.mubr.f32.mxu0 0.0
  %6108 = vmatmul.mubr.f32.gmra.mxu0 %v5769
  %v6109 = vpop.f32.mrf.mxu0
  %v6110 = vadd.f32 0.0, %v6109
  %v6111 = vpop.f32.mrf.mxu0
  %6112 = vmatprep.mubr.f32.mxu0 0.0
  %6113 = vmatmul.mubr.f32.gmra.mxu0 %v5772
  %v6114 = vpop.f32.mrf.mxu0
  %v6115 = vadd.f32 0.0, %v6114
  %v6116 = vpop.f32.mrf.mxu0
  %6117 = vmatprep.mubr.f32.mxu0 0.0
  %6118 = vmatmul.mubr.f32.gmra.mxu0 %v5775
  %v6119 = vpop.f32.mrf.mxu0
  %v6120 = vadd.f32 0.0, %v6119
  %v6121 = vpop.f32.mrf.mxu0
  %6122 = vmatprep.mubr.f32.mxu0 0.0
  %6123 = vmatmul.mubr.f32.gmra.mxu0 %v5778
  %v6124 = vpop.f32.mrf.mxu0
  %v6125 = vadd.f32 0.0, %v6124
  %v6126 = vpop.f32.mrf.mxu0
  %6127 = vmatprep.mubr.f32.mxu0 0.0
  %6128 = vmatmul.mubr.f32.gmra.mxu0 %v5781
  %v6129 = vpop.f32.mrf.mxu0
  %v6130 = vadd.f32 0.0, %v6129
  %v6131 = vpop.f32.mrf.mxu0
  %6132 = vmatprep.mubr.f32.mxu0 0.0
  %6133 = vmatmul.mubr.f32.gmra.mxu0 %v5784
  %v6134 = vpop.f32.mrf.mxu0
  %v6135 = vadd.f32 0.0, %v6134
  %v6136 = vpop.f32.mrf.mxu0
  %6137 = vmatprep.mubr.f32.mxu0 0.0
  %6138 = vmatmul.mubr.f32.gmra.mxu0 %v5787
  %v6139 = vpop.f32.mrf.mxu0
  %v6140 = vadd.f32 0.0, %v6139
  %v6141 = vpop.f32.mrf.mxu0
  %6142 = vmatprep.mubr.f32.mxu0 0.0
  %6143 = vmatmul.mubr.f32.gmra.mxu0 %v5790
  %v6144 = vpop.f32.mrf.mxu0
  %v6145 = vadd.f32 0.0, %v6144
  %v6146 = vpop.f32.mrf.mxu0
  %6147 = vmatprep.mubr.f32.mxu0 0.0
  %6148 = vmatmul.mubr.f32.gmra.mxu0 %v5793
  %v6149 = vpop.f32.mrf.mxu0
  %v6150 = vadd.f32 0.0, %v6149
  %v6151 = vpop.f32.mrf.mxu0
  %6152 = vmatprep.mubr.f32.mxu0 0.0
  %6153 = vmatmul.mubr.f32.gmra.mxu0 %v5796
  %v6154 = vpop.f32.mrf.mxu0
  %v6155 = vadd.f32 0.0, %v6154
  %v6156 = vpop.f32.mrf.mxu0
  %6157 = vmatprep.mubr.f32.mxu0 0.0
  %6158 = vmatmul.mubr.f32.gmra.mxu0 %v5799
  %v6159 = vpop.f32.mrf.mxu0
  %v6160 = vadd.f32 0.0, %v6159
  %v6161 = vpop.f32.mrf.mxu0
  %6162 = vmatprep.mubr.f32.mxu0 0.0
  %6163 = vmatmul.mubr.f32.gmra.mxu0 %v5802
  %v6164 = vpop.f32.mrf.mxu0
  %v6165 = vadd.f32 0.0, %v6164
  %v6166 = vpop.f32.mrf.mxu0
  %6167 = vmatprep.mubr.f32.mxu0 0.0
  %6168 = vmatmul.mubr.f32.gmra.mxu0 %v5805
  %v6169 = vpop.f32.mrf.mxu0
  %v6170 = vadd.f32 0.0, %v6169
  %v6171 = vpop.f32.mrf.mxu0
  %6172 = vmatprep.mubr.f32.mxu0 0.0
  %6173 = vmatmul.mubr.f32.gmra.mxu0 %v5808
  %v6174 = vpop.f32.mrf.mxu0
  %v6175 = vadd.f32 0.0, %v6174
  %v6176 = vpop.f32.mrf.mxu0
  %6177 = vmatprep.mubr.f32.mxu0 0.0
  %6178 = vmatmul.mubr.f32.gmra.mxu0 %v5811
  %v6179 = vpop.f32.mrf.mxu0
  %v6180 = vadd.f32 0.0, %v6179
  %v6181 = vpop.f32.mrf.mxu0
  %6182 = vmatprep.mubr.f32.mxu0 0.0
  %6183 = vmatmul.mubr.f32.gmra.mxu0 %v5814
  %v6184 = vpop.f32.mrf.mxu0
  %v6185 = vadd.f32 0.0, %v6184
  %v6186 = vpop.f32.mrf.mxu0
  %6187 = vmatprep.mubr.f32.mxu0 0.0
  %6188 = vmatmul.mubr.f32.gmra.mxu0 %v5817
  %v6189 = vpop.f32.mrf.mxu0
  %v6190 = vadd.f32 0.0, %v6189
  %v6191 = vpop.f32.mrf.mxu0
  %6192 = vmatprep.mubr.f32.mxu0 0.0
  %6193 = vmatmul.mubr.f32.gmra.mxu0 %v5820
  %v6194 = vpop.f32.mrf.mxu0
  %v6195 = vadd.f32 0.0, %v6194
  %v6196 = vpop.f32.mrf.mxu0
  %6197 = vmatprep.mubr.f32.mxu0 0.0
  %6198 = vmatmul.mubr.f32.gmra.mxu0 %v5823
  %v6199 = vpop.f32.mrf.mxu0
  %v6200 = vadd.f32 0.0, %v6199
  %v6201 = vpop.f32.mrf.mxu0
  %6202 = vmatprep.mubr.f32.mxu0 0.0
  %6203 = vmatmul.mubr.f32.gmra.mxu0 %v5826
  %v6204 = vpop.f32.mrf.mxu0
  %v6205 = vadd.f32 0.0, %v6204
  %v6206 = vpop.f32.mrf.mxu0
  %6207 = vmatprep.mubr.f32.mxu0 0.0
  %6208 = vmatmul.mubr.f32.gmra.mxu0 %v5829
  %v6209 = vpop.f32.mrf.mxu0
  %v6210 = vadd.f32 0.0, %v6209
  %v6211 = vpop.f32.mrf.mxu0
  %6212 = vmatprep.mubr.f32.mxu0 0.0
  %6213 = vmatmul.mubr.f32.gmra.mxu0 %v5832
  %v6214 = vpop.f32.mrf.mxu0
  %v6215 = vadd.f32 0.0, %v6214
  %v6216 = vpop.f32.mrf.mxu0
  %6217 = vmatprep.mubr.f32.mxu0 0.0
  %6218 = vmatmul.mubr.f32.gmra.mxu0 %v5835
  %v6219 = vpop.f32.mrf.mxu0
  %v6220 = vadd.f32 0.0, %v6219
  %v6221 = vpop.f32.mrf.mxu0
  %6222 = vmatprep.mubr.f32.mxu0 0.0
  %6223 = vmatmul.mubr.f32.gmra.mxu0 %v5838
  %v6224 = vpop.f32.mrf.mxu0
  %v6225 = vadd.f32 0.0, %v6224
  %v6226 = vpop.f32.mrf.mxu0
  %6227 = vdwg.mxu0
  %v6228 = vadd.f32 %v5518, %v5910
  %v6229 = vadd.f32 %v5519, %v5915
  %v6230 = vadd.f32 %v5520, %v5920
  %v6231 = vadd.f32 %v5521, %v5925
  %v6232 = vadd.f32 %v5522, %v5930
  %v6233 = vadd.f32 %v5523, %v5935
  %v6234 = vadd.f32 %v5524, %v5940
  %v6235 = vadd.f32 %v5525, %v5945
  %v6236 = vadd.f32 %v5526, %v5950
  %v6237 = vadd.f32 %v5527, %v5955
  %v6238 = vadd.f32 %v5528, %v5960
  %v6239 = vadd.f32 %v5529, %v5965
  %v6240 = vadd.f32 %v5530, %v5970
  %v6241 = vadd.f32 %v5531, %v5975
  %v6242 = vadd.f32 %v5532, %v5980
  %v6243 = vadd.f32 %v5533, %v5985
  %v6244 = vadd.f32 %v5534, %v5990
  %v6245 = vadd.f32 %v5535, %v5995
  %v6246 = vadd.f32 %v5536, %v6000
  %v6247 = vadd.f32 %v5537, %v6005
  %v6248 = vadd.f32 %v5538, %v6010
  %v6249 = vadd.f32 %v5539, %v6015
  %v6250 = vadd.f32 %v5540, %v6020
  %v6251 = vadd.f32 %v5541, %v6025
  %v6252 = vadd.f32 %v5542, %v6030
  %v6253 = vadd.f32 %v5543, %v6035
  %v6254 = vadd.f32 %v5544, %v6040
  %v6255 = vadd.f32 %v5545, %v6045
  %v6256 = vadd.f32 %v5546, %v6050
  %v6257 = vadd.f32 %v5547, %v6055
  %v6258 = vadd.f32 %v5548, %v6060
  %v6259 = vadd.f32 %v5549, %v6065
  %v6260 = vadd.f32 %v5550, %v6070
  %v6261 = vadd.f32 %v5551, %v6075
  %v6262 = vadd.f32 %v5552, %v6080
  %v6263 = vadd.f32 %v5553, %v6085
  %v6264 = vadd.f32 %v5554, %v6090
  %v6265 = vadd.f32 %v5555, %v6095
  %v6266 = vadd.f32 %v5556, %v6100
  %v6267 = vadd.f32 %v5557, %v6105
  %v6268 = vadd.f32 %v5558, %v6110
  %v6269 = vadd.f32 %v5559, %v6115
  %v6270 = vadd.f32 %v5560, %v6120
  %v6271 = vadd.f32 %v5561, %v6125
  %v6272 = vadd.f32 %v5562, %v6130
  %v6273 = vadd.f32 %v5563, %v6135
  %v6274 = vadd.f32 %v5564, %v6140
  %v6275 = vadd.f32 %v5565, %v6145
  %v6276 = vadd.f32 %v5566, %v6150
  %v6277 = vadd.f32 %v5567, %v6155
  %v6278 = vadd.f32 %v5568, %v6160
  %v6279 = vadd.f32 %v5569, %v6165
  %v6280 = vadd.f32 %v5570, %v6170
  %v6281 = vadd.f32 %v5571, %v6175
  %v6282 = vadd.f32 %v5572, %v6180
  %v6283 = vadd.f32 %v5573, %v6185
  %v6284 = vadd.f32 %v5574, %v6190
  %v6285 = vadd.f32 %v5575, %v6195
  %v6286 = vadd.f32 %v5576, %v6200
  %v6287 = vadd.f32 %v5577, %v6205
  %v6288 = vadd.f32 %v5578, %v6210
  %v6289 = vadd.f32 %v5579, %v6215
  %v6290 = vadd.f32 %v5580, %v6220
  %v6291 = vadd.f32 %v5581, %v6225
  %v6292 = vlaneseq
  %v6293 = vshrl.u32 %v6292, 7
  %v6294 = vsub.s32 0, %v6293
  %v6295 = vrot.slane %v20, %v6294
  %v6296 = vadd.f32 %v6228, %v6295
  %v6297 = vadd.f32 %v6229, %v6295
  %v6298 = vadd.f32 %v6230, %v6295
  %v6299 = vadd.f32 %v6231, %v6295
  %v6300 = vadd.f32 %v6232, %v6295
  %v6301 = vadd.f32 %v6233, %v6295
  %v6302 = vadd.f32 %v6234, %v6295
  %v6303 = vadd.f32 %v6235, %v6295
  %v6304 = vadd.f32 %v6236, %v6295
  %v6305 = vadd.f32 %v6237, %v6295
  %v6306 = vadd.f32 %v6238, %v6295
  %v6307 = vadd.f32 %v6239, %v6295
  %v6308 = vadd.f32 %v6240, %v6295
  %v6309 = vadd.f32 %v6241, %v6295
  %v6310 = vadd.f32 %v6242, %v6295
  %v6311 = vadd.f32 %v6243, %v6295
  %v6312 = vadd.f32 %v6244, %v6295
  %v6313 = vadd.f32 %v6245, %v6295
  %v6314 = vadd.f32 %v6246, %v6295
  %v6315 = vadd.f32 %v6247, %v6295
  %v6316 = vadd.f32 %v6248, %v6295
  %v6317 = vadd.f32 %v6249, %v6295
  %v6318 = vadd.f32 %v6250, %v6295
  %v6319 = vadd.f32 %v6251, %v6295
  %v6320 = vadd.f32 %v6252, %v6295
  %v6321 = vadd.f32 %v6253, %v6295
  %v6322 = vadd.f32 %v6254, %v6295
  %v6323 = vadd.f32 %v6255, %v6295
  %v6324 = vadd.f32 %v6256, %v6295
  %v6325 = vadd.f32 %v6257, %v6295
  %v6326 = vadd.f32 %v6258, %v6295
  %v6327 = vadd.f32 %v6259, %v6295
  %v6328 = vadd.f32 %v6260, %v6295
  %v6329 = vadd.f32 %v6261, %v6295
  %v6330 = vadd.f32 %v6262, %v6295
  %v6331 = vadd.f32 %v6263, %v6295
  %v6332 = vadd.f32 %v6264, %v6295
  %v6333 = vadd.f32 %v6265, %v6295
  %v6334 = vadd.f32 %v6266, %v6295
  %v6335 = vadd.f32 %v6267, %v6295
  %v6336 = vadd.f32 %v6268, %v6295
  %v6337 = vadd.f32 %v6269, %v6295
  %v6338 = vadd.f32 %v6270, %v6295
  %v6339 = vadd.f32 %v6271, %v6295
  %v6340 = vadd.f32 %v6272, %v6295
  %v6341 = vadd.f32 %v6273, %v6295
  %v6342 = vadd.f32 %v6274, %v6295
  %v6343 = vadd.f32 %v6275, %v6295
  %v6344 = vadd.f32 %v6276, %v6295
  %v6345 = vadd.f32 %v6277, %v6295
  %v6346 = vadd.f32 %v6278, %v6295
  %v6347 = vadd.f32 %v6279, %v6295
  %v6348 = vadd.f32 %v6280, %v6295
  %v6349 = vadd.f32 %v6281, %v6295
  %v6350 = vadd.f32 %v6282, %v6295
  %v6351 = vadd.f32 %v6283, %v6295
  %v6352 = vadd.f32 %v6284, %v6295
  %v6353 = vadd.f32 %v6285, %v6295
  %v6354 = vadd.f32 %v6286, %v6295
  %v6355 = vadd.f32 %v6287, %v6295
  %v6356 = vadd.f32 %v6288, %v6295
  %v6357 = vadd.f32 %v6289, %v6295
  %v6358 = vadd.f32 %v6290, %v6295
  %v6359 = vadd.f32 %v6291, %v6295
  %vm6360 = vcmask 64512
  %v6361 = vsel %vm6360, %v6296, 0.0
  %v6362 = vsel %vm6360, %v6297, 0.0
  %v6363 = vadd.f32 %v6361, %v6362
  %v6364 = vsel %vm6360, %v6298, 0.0
  %v6365 = vadd.f32 %v6363, %v6364
  %v6366 = vsel %vm6360, %v6299, 0.0
  %v6367 = vadd.f32 %v6365, %v6366
  %v6368 = vsel %vm6360, %v6300, 0.0
  %v6369 = vadd.f32 %v6367, %v6368
  %v6370 = vsel %vm6360, %v6301, 0.0
  %v6371 = vadd.f32 %v6369, %v6370
  %v6372 = vsel %vm6360, %v6302, 0.0
  %v6373 = vadd.f32 %v6371, %v6372
  %v6374 = vsel %vm6360, %v6303, 0.0
  %v6375 = vadd.f32 %v6373, %v6374
  %v6376 = vsel %vm6360, %v6304, 0.0
  %v6377 = vadd.f32 %v6375, %v6376
  %v6378 = vsel %vm6360, %v6305, 0.0
  %v6379 = vadd.f32 %v6377, %v6378
  %v6380 = vsel %vm6360, %v6306, 0.0
  %v6381 = vadd.f32 %v6379, %v6380
  %v6382 = vsel %vm6360, %v6307, 0.0
  %v6383 = vadd.f32 %v6381, %v6382
  %v6384 = vsel %vm6360, %v6308, 0.0
  %v6385 = vadd.f32 %v6383, %v6384
  %v6386 = vsel %vm6360, %v6309, 0.0
  %v6387 = vadd.f32 %v6385, %v6386
  %v6388 = vsel %vm6360, %v6310, 0.0
  %v6389 = vadd.f32 %v6387, %v6388
  %v6390 = vsel %vm6360, %v6311, 0.0
  %v6391 = vadd.f32 %v6389, %v6390
  %v6392 = vsel %vm6360, %v6312, 0.0
  %v6393 = vadd.f32 %v6391, %v6392
  %v6394 = vsel %vm6360, %v6313, 0.0
  %v6395 = vadd.f32 %v6393, %v6394
  %v6396 = vsel %vm6360, %v6314, 0.0
  %v6397 = vadd.f32 %v6395, %v6396
  %v6398 = vsel %vm6360, %v6315, 0.0
  %v6399 = vadd.f32 %v6397, %v6398
  %v6400 = vsel %vm6360, %v6316, 0.0
  %v6401 = vadd.f32 %v6399, %v6400
  %v6402 = vsel %vm6360, %v6317, 0.0
  %v6403 = vadd.f32 %v6401, %v6402
  %v6404 = vsel %vm6360, %v6318, 0.0
  %v6405 = vadd.f32 %v6403, %v6404
  %v6406 = vsel %vm6360, %v6319, 0.0
  %v6407 = vadd.f32 %v6405, %v6406
  %v6408 = vsel %vm6360, %v6320, 0.0
  %v6409 = vadd.f32 %v6407, %v6408
  %v6410 = vsel %vm6360, %v6321, 0.0
  %v6411 = vadd.f32 %v6409, %v6410
  %v6412 = vsel %vm6360, %v6322, 0.0
  %v6413 = vadd.f32 %v6411, %v6412
  %v6414 = vsel %vm6360, %v6323, 0.0
  %v6415 = vadd.f32 %v6413, %v6414
  %v6416 = vsel %vm6360, %v6324, 0.0
  %v6417 = vadd.f32 %v6415, %v6416
  %v6418 = vsel %vm6360, %v6325, 0.0
  %v6419 = vadd.f32 %v6417, %v6418
  %v6420 = vsel %vm6360, %v6326, 0.0
  %v6421 = vadd.f32 %v6419, %v6420
  %v6422 = vsel %vm6360, %v6327, 0.0
  %v6423 = vadd.f32 %v6421, %v6422
  %v6424 = vsel %vm6360, %v6328, 0.0
  %v6425 = vadd.f32 %v6423, %v6424
  %v6426 = vsel %vm6360, %v6329, 0.0
  %v6427 = vadd.f32 %v6425, %v6426
  %v6428 = vsel %vm6360, %v6330, 0.0
  %v6429 = vadd.f32 %v6427, %v6428
  %v6430 = vsel %vm6360, %v6331, 0.0
  %v6431 = vadd.f32 %v6429, %v6430
  %v6432 = vsel %vm6360, %v6332, 0.0
  %v6433 = vadd.f32 %v6431, %v6432
  %v6434 = vsel %vm6360, %v6333, 0.0
  %v6435 = vadd.f32 %v6433, %v6434
  %v6436 = vsel %vm6360, %v6334, 0.0
  %v6437 = vadd.f32 %v6435, %v6436
  %v6438 = vsel %vm6360, %v6335, 0.0
  %v6439 = vadd.f32 %v6437, %v6438
  %v6440 = vsel %vm6360, %v6336, 0.0
  %v6441 = vadd.f32 %v6439, %v6440
  %v6442 = vsel %vm6360, %v6337, 0.0
  %v6443 = vadd.f32 %v6441, %v6442
  %v6444 = vsel %vm6360, %v6338, 0.0
  %v6445 = vadd.f32 %v6443, %v6444
  %v6446 = vsel %vm6360, %v6339, 0.0
  %v6447 = vadd.f32 %v6445, %v6446
  %v6448 = vsel %vm6360, %v6340, 0.0
  %v6449 = vadd.f32 %v6447, %v6448
  %v6450 = vsel %vm6360, %v6341, 0.0
  %v6451 = vadd.f32 %v6449, %v6450
  %v6452 = vsel %vm6360, %v6342, 0.0
  %v6453 = vadd.f32 %v6451, %v6452
  %v6454 = vsel %vm6360, %v6343, 0.0
  %v6455 = vadd.f32 %v6453, %v6454
  %v6456 = vsel %vm6360, %v6344, 0.0
  %v6457 = vadd.f32 %v6455, %v6456
  %v6458 = vsel %vm6360, %v6345, 0.0
  %v6459 = vadd.f32 %v6457, %v6458
  %v6460 = vsel %vm6360, %v6346, 0.0
  %v6461 = vadd.f32 %v6459, %v6460
  %v6462 = vsel %vm6360, %v6347, 0.0
  %v6463 = vadd.f32 %v6461, %v6462
  %v6464 = vsel %vm6360, %v6348, 0.0
  %v6465 = vadd.f32 %v6463, %v6464
  %v6466 = vsel %vm6360, %v6349, 0.0
  %v6467 = vadd.f32 %v6465, %v6466
  %v6468 = vsel %vm6360, %v6350, 0.0
  %v6469 = vadd.f32 %v6467, %v6468
  %v6470 = vsel %vm6360, %v6351, 0.0
  %v6471 = vadd.f32 %v6469, %v6470
  %v6472 = vsel %vm6360, %v6352, 0.0
  %v6473 = vadd.f32 %v6471, %v6472
  %v6474 = vsel %vm6360, %v6353, 0.0
  %v6475 = vadd.f32 %v6473, %v6474
  %v6476 = vsel %vm6360, %v6354, 0.0
  %v6477 = vadd.f32 %v6475, %v6476
  %v6478 = vsel %vm6360, %v6355, 0.0
  %v6479 = vadd.f32 %v6477, %v6478
  %v6480 = vsel %vm6360, %v6356, 0.0
  %v6481 = vadd.f32 %v6479, %v6480
  %v6482 = vsel %vm6360, %v6357, 0.0
  %v6483 = vadd.f32 %v6481, %v6482
  %v6484 = vsel %vm6360, %v6358, 0.0
  %v6485 = vadd.f32 %v6483, %v6484
  %v6486 = vsel %vm6360, %v6359, 0.0
  %v6487 = vadd.f32 %v6485, %v6486
  %v6488 = vrot.slane %v6487, 4
  %v6489 = vadd.f32 %v6487, %v6488
  %v6490 = vrot.slane %v6489, 2
  %v6491 = vadd.f32 %v6489, %v6490
  %v6492 = vrot.slane %v6491, 1
  %v6493 = vadd.f32 %v6491, %v6492
  %v6494 = vrcp.pop 512.0
  %v6495 = vmul.f32 %v6493, %v6494
  %v6496 = vmul.f32 %v6296, %v6296
  %v6497 = vmul.f32 %v6297, %v6297
  %v6498 = vmul.f32 %v6298, %v6298
  %v6499 = vmul.f32 %v6299, %v6299
  %v6500 = vmul.f32 %v6300, %v6300
  %v6501 = vmul.f32 %v6301, %v6301
  %v6502 = vmul.f32 %v6302, %v6302
  %v6503 = vmul.f32 %v6303, %v6303
  %v6504 = vmul.f32 %v6304, %v6304
  %v6505 = vmul.f32 %v6305, %v6305
  %v6506 = vmul.f32 %v6306, %v6306
  %v6507 = vmul.f32 %v6307, %v6307
  %v6508 = vmul.f32 %v6308, %v6308
  %v6509 = vmul.f32 %v6309, %v6309
  %v6510 = vmul.f32 %v6310, %v6310
  %v6511 = vmul.f32 %v6311, %v6311
  %v6512 = vmul.f32 %v6312, %v6312
  %v6513 = vmul.f32 %v6313, %v6313
  %v6514 = vmul.f32 %v6314, %v6314
  %v6515 = vmul.f32 %v6315, %v6315
  %v6516 = vmul.f32 %v6316, %v6316
  %v6517 = vmul.f32 %v6317, %v6317
  %v6518 = vmul.f32 %v6318, %v6318
  %v6519 = vmul.f32 %v6319, %v6319
  %v6520 = vmul.f32 %v6320, %v6320
  %v6521 = vmul.f32 %v6321, %v6321
  %v6522 = vmul.f32 %v6322, %v6322
  %v6523 = vmul.f32 %v6323, %v6323
  %v6524 = vmul.f32 %v6324, %v6324
  %v6525 = vmul.f32 %v6325, %v6325
  %v6526 = vmul.f32 %v6326, %v6326
  %v6527 = vmul.f32 %v6327, %v6327
  %v6528 = vmul.f32 %v6328, %v6328
  %v6529 = vmul.f32 %v6329, %v6329
  %v6530 = vmul.f32 %v6330, %v6330
  %v6531 = vmul.f32 %v6331, %v6331
  %v6532 = vmul.f32 %v6332, %v6332
  %v6533 = vmul.f32 %v6333, %v6333
  %v6534 = vmul.f32 %v6334, %v6334
  %v6535 = vmul.f32 %v6335, %v6335
  %v6536 = vmul.f32 %v6336, %v6336
  %v6537 = vmul.f32 %v6337, %v6337
  %v6538 = vmul.f32 %v6338, %v6338
  %v6539 = vmul.f32 %v6339, %v6339
  %v6540 = vmul.f32 %v6340, %v6340
  %v6541 = vmul.f32 %v6341, %v6341
  %v6542 = vmul.f32 %v6342, %v6342
  %v6543 = vmul.f32 %v6343, %v6343
  %v6544 = vmul.f32 %v6344, %v6344
  %v6545 = vmul.f32 %v6345, %v6345
  %v6546 = vmul.f32 %v6346, %v6346
  %v6547 = vmul.f32 %v6347, %v6347
  %v6548 = vmul.f32 %v6348, %v6348
  %v6549 = vmul.f32 %v6349, %v6349
  %v6550 = vmul.f32 %v6350, %v6350
  %v6551 = vmul.f32 %v6351, %v6351
  %v6552 = vmul.f32 %v6352, %v6352
  %v6553 = vmul.f32 %v6353, %v6353
  %v6554 = vmul.f32 %v6354, %v6354
  %v6555 = vmul.f32 %v6355, %v6355
  %v6556 = vmul.f32 %v6356, %v6356
  %v6557 = vmul.f32 %v6357, %v6357
  %v6558 = vmul.f32 %v6358, %v6358
  %v6559 = vmul.f32 %v6359, %v6359
  %v6560 = vsel %vm6360, %v6496, 0.0
  %v6561 = vsel %vm6360, %v6497, 0.0
  %v6562 = vadd.f32 %v6560, %v6561
  %v6563 = vsel %vm6360, %v6498, 0.0
  %v6564 = vadd.f32 %v6562, %v6563
  %v6565 = vsel %vm6360, %v6499, 0.0
  %v6566 = vadd.f32 %v6564, %v6565
  %v6567 = vsel %vm6360, %v6500, 0.0
  %v6568 = vadd.f32 %v6566, %v6567
  %v6569 = vsel %vm6360, %v6501, 0.0
  %v6570 = vadd.f32 %v6568, %v6569
  %v6571 = vsel %vm6360, %v6502, 0.0
  %v6572 = vadd.f32 %v6570, %v6571
  %v6573 = vsel %vm6360, %v6503, 0.0
  %v6574 = vadd.f32 %v6572, %v6573
  %v6575 = vsel %vm6360, %v6504, 0.0
  %v6576 = vadd.f32 %v6574, %v6575
  %v6577 = vsel %vm6360, %v6505, 0.0
  %v6578 = vadd.f32 %v6576, %v6577
  %v6579 = vsel %vm6360, %v6506, 0.0
  %v6580 = vadd.f32 %v6578, %v6579
  %v6581 = vsel %vm6360, %v6507, 0.0
  %v6582 = vadd.f32 %v6580, %v6581
  %v6583 = vsel %vm6360, %v6508, 0.0
  %v6584 = vadd.f32 %v6582, %v6583
  %v6585 = vsel %vm6360, %v6509, 0.0
  %v6586 = vadd.f32 %v6584, %v6585
  %v6587 = vsel %vm6360, %v6510, 0.0
  %v6588 = vadd.f32 %v6586, %v6587
  %v6589 = vsel %vm6360, %v6511, 0.0
  %v6590 = vadd.f32 %v6588, %v6589
  %v6591 = vsel %vm6360, %v6512, 0.0
  %v6592 = vadd.f32 %v6590, %v6591
  %v6593 = vsel %vm6360, %v6513, 0.0
  %v6594 = vadd.f32 %v6592, %v6593
  %v6595 = vsel %vm6360, %v6514, 0.0
  %v6596 = vadd.f32 %v6594, %v6595
  %v6597 = vsel %vm6360, %v6515, 0.0
  %v6598 = vadd.f32 %v6596, %v6597
  %v6599 = vsel %vm6360, %v6516, 0.0
  %v6600 = vadd.f32 %v6598, %v6599
  %v6601 = vsel %vm6360, %v6517, 0.0
  %v6602 = vadd.f32 %v6600, %v6601
  %v6603 = vsel %vm6360, %v6518, 0.0
  %v6604 = vadd.f32 %v6602, %v6603
  %v6605 = vsel %vm6360, %v6519, 0.0
  %v6606 = vadd.f32 %v6604, %v6605
  %v6607 = vsel %vm6360, %v6520, 0.0
  %v6608 = vadd.f32 %v6606, %v6607
  %v6609 = vsel %vm6360, %v6521, 0.0
  %v6610 = vadd.f32 %v6608, %v6609
  %v6611 = vsel %vm6360, %v6522, 0.0
  %v6612 = vadd.f32 %v6610, %v6611
  %v6613 = vsel %vm6360, %v6523, 0.0
  %v6614 = vadd.f32 %v6612, %v6613
  %v6615 = vsel %vm6360, %v6524, 0.0
  %v6616 = vadd.f32 %v6614, %v6615
  %v6617 = vsel %vm6360, %v6525, 0.0
  %v6618 = vadd.f32 %v6616, %v6617
  %v6619 = vsel %vm6360, %v6526, 0.0
  %v6620 = vadd.f32 %v6618, %v6619
  %v6621 = vsel %vm6360, %v6527, 0.0
  %v6622 = vadd.f32 %v6620, %v6621
  %v6623 = vsel %vm6360, %v6528, 0.0
  %v6624 = vadd.f32 %v6622, %v6623
  %v6625 = vsel %vm6360, %v6529, 0.0
  %v6626 = vadd.f32 %v6624, %v6625
  %v6627 = vsel %vm6360, %v6530, 0.0
  %v6628 = vadd.f32 %v6626, %v6627
  %v6629 = vsel %vm6360, %v6531, 0.0
  %v6630 = vadd.f32 %v6628, %v6629
  %v6631 = vsel %vm6360, %v6532, 0.0
  %v6632 = vadd.f32 %v6630, %v6631
  %v6633 = vsel %vm6360, %v6533, 0.0
  %v6634 = vadd.f32 %v6632, %v6633
  %v6635 = vsel %vm6360, %v6534, 0.0
  %v6636 = vadd.f32 %v6634, %v6635
  %v6637 = vsel %vm6360, %v6535, 0.0
  %v6638 = vadd.f32 %v6636, %v6637
  %v6639 = vsel %vm6360, %v6536, 0.0
  %v6640 = vadd.f32 %v6638, %v6639
  %v6641 = vsel %vm6360, %v6537, 0.0
  %v6642 = vadd.f32 %v6640, %v6641
  %v6643 = vsel %vm6360, %v6538, 0.0
  %v6644 = vadd.f32 %v6642, %v6643
  %v6645 = vsel %vm6360, %v6539, 0.0
  %v6646 = vadd.f32 %v6644, %v6645
  %v6647 = vsel %vm6360, %v6540, 0.0
  %v6648 = vadd.f32 %v6646, %v6647
  %v6649 = vsel %vm6360, %v6541, 0.0
  %v6650 = vadd.f32 %v6648, %v6649
  %v6651 = vsel %vm6360, %v6542, 0.0
  %v6652 = vadd.f32 %v6650, %v6651
  %v6653 = vsel %vm6360, %v6543, 0.0
  %v6654 = vadd.f32 %v6652, %v6653
  %v6655 = vsel %vm6360, %v6544, 0.0
  %v6656 = vadd.f32 %v6654, %v6655
  %v6657 = vsel %vm6360, %v6545, 0.0
  %v6658 = vadd.f32 %v6656, %v6657
  %v6659 = vsel %vm6360, %v6546, 0.0
  %v6660 = vadd.f32 %v6658, %v6659
  %v6661 = vsel %vm6360, %v6547, 0.0
  %v6662 = vadd.f32 %v6660, %v6661
  %v6663 = vsel %vm6360, %v6548, 0.0
  %v6664 = vadd.f32 %v6662, %v6663
  %v6665 = vsel %vm6360, %v6549, 0.0
  %v6666 = vadd.f32 %v6664, %v6665
  %v6667 = vsel %vm6360, %v6550, 0.0
  %v6668 = vadd.f32 %v6666, %v6667
  %v6669 = vsel %vm6360, %v6551, 0.0
  %v6670 = vadd.f32 %v6668, %v6669
  %v6671 = vsel %vm6360, %v6552, 0.0
  %v6672 = vadd.f32 %v6670, %v6671
  %v6673 = vsel %vm6360, %v6553, 0.0
  %v6674 = vadd.f32 %v6672, %v6673
  %v6675 = vsel %vm6360, %v6554, 0.0
  %v6676 = vadd.f32 %v6674, %v6675
  %v6677 = vsel %vm6360, %v6555, 0.0
  %v6678 = vadd.f32 %v6676, %v6677
  %v6679 = vsel %vm6360, %v6556, 0.0
  %v6680 = vadd.f32 %v6678, %v6679
  %v6681 = vsel %vm6360, %v6557, 0.0
  %v6682 = vadd.f32 %v6680, %v6681
  %v6683 = vsel %vm6360, %v6558, 0.0
  %v6684 = vadd.f32 %v6682, %v6683
  %v6685 = vsel %vm6360, %v6559, 0.0
  %v6686 = vadd.f32 %v6684, %v6685
  %v6687 = vrot.slane %v6686, 4
  %v6688 = vadd.f32 %v6686, %v6687
  %v6689 = vrot.slane %v6688, 2
  %v6690 = vadd.f32 %v6688, %v6689
  %v6691 = vrot.slane %v6690, 1
  %v6692 = vadd.f32 %v6690, %v6691
  %v6693 = vmul.f32 %v6692, %v6494
  %v6694 = vmul.f32 %v6495, %v6495
  %v6695 = vsub.f32 %v6693, %v6694
  %v6696 = vadd.f32 %v6695, 1e-05
  %v6697 = vrsqrt.pop %v6696
  %v6698 = vmul.f32 %v21, %v6697
  %v6699 = vlaneseq
  %v6700 = vshrl.u32 %v6699, 7
  %v6701 = vsub.s32 0, %v6700
  %v6702 = vrot.slane %v6698, %v6701
  %v6703 = vmul.f32 %v6296, %v6702
  %v6704 = vmul.f32 %v6297, %v6702
  %v6705 = vmul.f32 %v6298, %v6702
  %v6706 = vmul.f32 %v6299, %v6702
  %v6707 = vmul.f32 %v6300, %v6702
  %v6708 = vmul.f32 %v6301, %v6702
  %v6709 = vmul.f32 %v6302, %v6702
  %v6710 = vmul.f32 %v6303, %v6702
  %v6711 = vmul.f32 %v6304, %v6702
  %v6712 = vmul.f32 %v6305, %v6702
  %v6713 = vmul.f32 %v6306, %v6702
  %v6714 = vmul.f32 %v6307, %v6702
  %v6715 = vmul.f32 %v6308, %v6702
  %v6716 = vmul.f32 %v6309, %v6702
  %v6717 = vmul.f32 %v6310, %v6702
  %v6718 = vmul.f32 %v6311, %v6702
  %v6719 = vmul.f32 %v6312, %v6702
  %v6720 = vmul.f32 %v6313, %v6702
  %v6721 = vmul.f32 %v6314, %v6702
  %v6722 = vmul.f32 %v6315, %v6702
  %v6723 = vmul.f32 %v6316, %v6702
  %v6724 = vmul.f32 %v6317, %v6702
  %v6725 = vmul.f32 %v6318, %v6702
  %v6726 = vmul.f32 %v6319, %v6702
  %v6727 = vmul.f32 %v6320, %v6702
  %v6728 = vmul.f32 %v6321, %v6702
  %v6729 = vmul.f32 %v6322, %v6702
  %v6730 = vmul.f32 %v6323, %v6702
  %v6731 = vmul.f32 %v6324, %v6702
  %v6732 = vmul.f32 %v6325, %v6702
  %v6733 = vmul.f32 %v6326, %v6702
  %v6734 = vmul.f32 %v6327, %v6702
  %v6735 = vmul.f32 %v6328, %v6702
  %v6736 = vmul.f32 %v6329, %v6702
  %v6737 = vmul.f32 %v6330, %v6702
  %v6738 = vmul.f32 %v6331, %v6702
  %v6739 = vmul.f32 %v6332, %v6702
  %v6740 = vmul.f32 %v6333, %v6702
  %v6741 = vmul.f32 %v6334, %v6702
  %v6742 = vmul.f32 %v6335, %v6702
  %v6743 = vmul.f32 %v6336, %v6702
  %v6744 = vmul.f32 %v6337, %v6702
  %v6745 = vmul.f32 %v6338, %v6702
  %v6746 = vmul.f32 %v6339, %v6702
  %v6747 = vmul.f32 %v6340, %v6702
  %v6748 = vmul.f32 %v6341, %v6702
  %v6749 = vmul.f32 %v6342, %v6702
  %v6750 = vmul.f32 %v6343, %v6702
  %v6751 = vmul.f32 %v6344, %v6702
  %v6752 = vmul.f32 %v6345, %v6702
  %v6753 = vmul.f32 %v6346, %v6702
  %v6754 = vmul.f32 %v6347, %v6702
  %v6755 = vmul.f32 %v6348, %v6702
  %v6756 = vmul.f32 %v6349, %v6702
  %v6757 = vmul.f32 %v6350, %v6702
  %v6758 = vmul.f32 %v6351, %v6702
  %v6759 = vmul.f32 %v6352, %v6702
  %v6760 = vmul.f32 %v6353, %v6702
  %v6761 = vmul.f32 %v6354, %v6702
  %v6762 = vmul.f32 %v6355, %v6702
  %v6763 = vmul.f32 %v6356, %v6702
  %v6764 = vmul.f32 %v6357, %v6702
  %v6765 = vmul.f32 %v6358, %v6702
  %v6766 = vmul.f32 %v6359, %v6702
  %v6767 = vmul.f32 %v6495, %v6698
  %v6768 = vsub.f32 %v22, %v6767
  %v6769 = vlaneseq
  %v6770 = vshrl.u32 %v6769, 7
  %v6771 = vsub.s32 0, %v6770
  %v6772 = vrot.slane %v6768, %v6771
  %v6773 = vadd.f32 %v6703, %v6772
  %v6774 = vadd.f32 %v6704, %v6772
  %v6775 = vadd.f32 %v6705, %v6772
  %v6776 = vadd.f32 %v6706, %v6772
  %v6777 = vadd.f32 %v6707, %v6772
  %v6778 = vadd.f32 %v6708, %v6772
  %v6779 = vadd.f32 %v6709, %v6772
  %v6780 = vadd.f32 %v6710, %v6772
  %v6781 = vadd.f32 %v6711, %v6772
  %v6782 = vadd.f32 %v6712, %v6772
  %v6783 = vadd.f32 %v6713, %v6772
  %v6784 = vadd.f32 %v6714, %v6772
  %v6785 = vadd.f32 %v6715, %v6772
  %v6786 = vadd.f32 %v6716, %v6772
  %v6787 = vadd.f32 %v6717, %v6772
  %v6788 = vadd.f32 %v6718, %v6772
  %v6789 = vadd.f32 %v6719, %v6772
  %v6790 = vadd.f32 %v6720, %v6772
  %v6791 = vadd.f32 %v6721, %v6772
  %v6792 = vadd.f32 %v6722, %v6772
  %v6793 = vadd.f32 %v6723, %v6772
  %v6794 = vadd.f32 %v6724, %v6772
  %v6795 = vadd.f32 %v6725, %v6772
  %v6796 = vadd.f32 %v6726, %v6772
  %v6797 = vadd.f32 %v6727, %v6772
  %v6798 = vadd.f32 %v6728, %v6772
  %v6799 = vadd.f32 %v6729, %v6772
  %v6800 = vadd.f32 %v6730, %v6772
  %v6801 = vadd.f32 %v6731, %v6772
  %v6802 = vadd.f32 %v6732, %v6772
  %v6803 = vadd.f32 %v6733, %v6772
  %v6804 = vadd.f32 %v6734, %v6772
  %v6805 = vadd.f32 %v6735, %v6772
  %v6806 = vadd.f32 %v6736, %v6772
  %v6807 = vadd.f32 %v6737, %v6772
  %v6808 = vadd.f32 %v6738, %v6772
  %v6809 = vadd.f32 %v6739, %v6772
  %v6810 = vadd.f32 %v6740, %v6772
  %v6811 = vadd.f32 %v6741, %v6772
  %v6812 = vadd.f32 %v6742, %v6772
  %v6813 = vadd.f32 %v6743, %v6772
  %v6814 = vadd.f32 %v6744, %v6772
  %v6815 = vadd.f32 %v6745, %v6772
  %v6816 = vadd.f32 %v6746, %v6772
  %v6817 = vadd.f32 %v6747, %v6772
  %v6818 = vadd.f32 %v6748, %v6772
  %v6819 = vadd.f32 %v6749, %v6772
  %v6820 = vadd.f32 %v6750, %v6772
  %v6821 = vadd.f32 %v6751, %v6772
  %v6822 = vadd.f32 %v6752, %v6772
  %v6823 = vadd.f32 %v6753, %v6772
  %v6824 = vadd.f32 %v6754, %v6772
  %v6825 = vadd.f32 %v6755, %v6772
  %v6826 = vadd.f32 %v6756, %v6772
  %v6827 = vadd.f32 %v6757, %v6772
  %v6828 = vadd.f32 %v6758, %v6772
  %v6829 = vadd.f32 %v6759, %v6772
  %v6830 = vadd.f32 %v6760, %v6772
  %v6831 = vadd.f32 %v6761, %v6772
  %v6832 = vadd.f32 %v6762, %v6772
  %v6833 = vadd.f32 %v6763, %v6772
  %v6834 = vadd.f32 %v6764, %v6772
  %v6835 = vadd.f32 %v6765, %v6772
  %v6836 = vadd.f32 %v6766, %v6772
  %v6837 = vmax.f32 %v6773, 0.0
  %v6838 = vmax.f32 %v6774, 0.0
  %v6839 = vmax.f32 %v6775, 0.0
  %v6840 = vmax.f32 %v6776, 0.0
  %v6841 = vmax.f32 %v6777, 0.0
  %v6842 = vmax.f32 %v6778, 0.0
  %v6843 = vmax.f32 %v6779, 0.0
  %v6844 = vmax.f32 %v6780, 0.0
  %v6845 = vmax.f32 %v6781, 0.0
  %v6846 = vmax.f32 %v6782, 0.0
  %v6847 = vmax.f32 %v6783, 0.0
  %v6848 = vmax.f32 %v6784, 0.0
  %v6849 = vmax.f32 %v6785, 0.0
  %v6850 = vmax.f32 %v6786, 0.0
  %v6851 = vmax.f32 %v6787, 0.0
  %v6852 = vmax.f32 %v6788, 0.0
  %v6853 = vmax.f32 %v6789, 0.0
  %v6854 = vmax.f32 %v6790, 0.0
  %v6855 = vmax.f32 %v6791, 0.0
  %v6856 = vmax.f32 %v6792, 0.0
  %v6857 = vmax.f32 %v6793, 0.0
  %v6858 = vmax.f32 %v6794, 0.0
  %v6859 = vmax.f32 %v6795, 0.0
  %v6860 = vmax.f32 %v6796, 0.0
  %v6861 = vmax.f32 %v6797, 0.0
  %v6862 = vmax.f32 %v6798, 0.0
  %v6863 = vmax.f32 %v6799, 0.0
  %v6864 = vmax.f32 %v6800, 0.0
  %v6865 = vmax.f32 %v6801, 0.0
  %v6866 = vmax.f32 %v6802, 0.0
  %v6867 = vmax.f32 %v6803, 0.0
  %v6868 = vmax.f32 %v6804, 0.0
  %v6869 = vmax.f32 %v6805, 0.0
  %v6870 = vmax.f32 %v6806, 0.0
  %v6871 = vmax.f32 %v6807, 0.0
  %v6872 = vmax.f32 %v6808, 0.0
  %v6873 = vmax.f32 %v6809, 0.0
  %v6874 = vmax.f32 %v6810, 0.0
  %v6875 = vmax.f32 %v6811, 0.0
  %v6876 = vmax.f32 %v6812, 0.0
  %v6877 = vmax.f32 %v6813, 0.0
  %v6878 = vmax.f32 %v6814, 0.0
  %v6879 = vmax.f32 %v6815, 0.0
  %v6880 = vmax.f32 %v6816, 0.0
  %v6881 = vmax.f32 %v6817, 0.0
  %v6882 = vmax.f32 %v6818, 0.0
  %v6883 = vmax.f32 %v6819, 0.0
  %v6884 = vmax.f32 %v6820, 0.0
  %v6885 = vmax.f32 %v6821, 0.0
  %v6886 = vmax.f32 %v6822, 0.0
  %v6887 = vmax.f32 %v6823, 0.0
  %v6888 = vmax.f32 %v6824, 0.0
  %v6889 = vmax.f32 %v6825, 0.0
  %v6890 = vmax.f32 %v6826, 0.0
  %v6891 = vmax.f32 %v6827, 0.0
  %v6892 = vmax.f32 %v6828, 0.0
  %v6893 = vmax.f32 %v6829, 0.0
  %v6894 = vmax.f32 %v6830, 0.0
  %v6895 = vmax.f32 %v6831, 0.0
  %v6896 = vmax.f32 %v6832, 0.0
  %v6897 = vmax.f32 %v6833, 0.0
  %v6898 = vmax.f32 %v6834, 0.0
  %v6899 = vmax.f32 %v6835, 0.0
  %v6900 = vmax.f32 %v6836, 0.0
  %6901 = vst.msk [vmem:[#allocation2] sm:$0xff] %vm6360, 0.0
  %6902 = vst.msk [vmem:[#allocation2 + $0x8] sm:$0xff] %vm6360, 0.0
  %vm6903 = vcmask 58368
  %6904 = vst.msk [vmem:[#allocation2 + $0x10] sm:$0x3] %vm6903, 0.0
  %6905 = vst.msk [vmem:[#allocation2 + $0x1b0] sm:$0xff] %vm6360, 0.0
  %6906 = vst.msk [vmem:[#allocation2 + $0x1b8] sm:$0xff] %vm6360, 0.0
  %6907 = vst.msk [vmem:[#allocation2 + $0x1c0] sm:$0x3] %vm6903, 0.0
  %s6908 = scalar_lea.vmem [#allocation2], 408
  %6909 = vst.msk [vmem:[%s6908] sm:$0xff] %vm6360, 0.0
  %6910 = vst.msk [vmem:[%s6908 + $0x8] sm:$0xff] %vm6360, 0.0
  %6911 = vst.msk [vmem:[%s6908 + $0x10] sm:$0x3] %vm6903, 0.0
  %6912 = vst.msk [vmem:[%s6908 + $0x1b0] sm:$0xff] %vm6360, 0.0
  %6913 = vst.msk [vmem:[%s6908 + $0x1b8] sm:$0xff] %vm6360, 0.0
  %6914 = vst.msk [vmem:[%s6908 + $0x1c0] sm:$0x3] %vm6903, 0.0
  %vm6915 = vcmask 57344
  %6916 = vst.msk [vmem:[#allocation2] sm:$0x1] %vm6915, 0.0
  %6917 = vst.msk [vmem:[#allocation2 + $0x18] sm:$0x1] %vm6915, 0.0
  %6918 = vst.msk [vmem:[#allocation2 + $0x30] sm:$0x1] %vm6915, 0.0
  %6919 = vst.msk [vmem:[#allocation2 + $0x48] sm:$0x1] %vm6915, 0.0
  %6920 = vst.msk [vmem:[#allocation2 + $0x60] sm:$0x1] %vm6915, 0.0
  %6921 = vst.msk [vmem:[#allocation2 + $0x78] sm:$0x1] %vm6915, 0.0
  %6922 = vst.msk [vmem:[#allocation2 + $0x90] sm:$0x1] %vm6915, 0.0
  %6923 = vst.msk [vmem:[#allocation2 + $0xa8] sm:$0x1] %vm6915, 0.0
  %6924 = vst.msk [vmem:[#allocation2 + $0xc0] sm:$0x1] %vm6915, 0.0
  %6925 = vst.msk [vmem:[#allocation2 + $0xd8] sm:$0x1] %vm6915, 0.0
  %6926 = vst.msk [vmem:[#allocation2 + $0xf0] sm:$0x1] %vm6915, 0.0
  %6927 = vst.msk [vmem:[#allocation2 + $0x108] sm:$0x1] %vm6915, 0.0
  %6928 = vst.msk [vmem:[#allocation2 + $0x120] sm:$0x1] %vm6915, 0.0
  %6929 = vst.msk [vmem:[#allocation2 + $0x138] sm:$0x1] %vm6915, 0.0
  %6930 = vst.msk [vmem:[#allocation2 + $0x150] sm:$0x1] %vm6915, 0.0
  %6931 = vst.msk [vmem:[#allocation2 + $0x168] sm:$0x1] %vm6915, 0.0
  %6932 = vst.msk [vmem:[#allocation2 + $0x180] sm:$0x1] %vm6915, 0.0
  %6933 = vst.msk [vmem:[#allocation2 + $0x198] sm:$0x1] %vm6915, 0.0
  %6934 = vst.msk [vmem:[#allocation2 + $0x1b0] sm:$0x1] %vm6915, 0.0
  %6935 = vst.msk [vmem:[#allocation2 + $0x1c8] sm:$0x1] %vm6915, 0.0
  %6936 = vst.msk [vmem:[#allocation2 + $0x1e0] sm:$0x1] %vm6915, 0.0
  %6937 = vst.msk [vmem:[#allocation2 + $0x1f8] sm:$0x1] %vm6915, 0.0
  %6938 = vst.msk [vmem:[#allocation2 + $0x210] sm:$0x1] %vm6915, 0.0
  %6939 = vst.msk [vmem:[#allocation2 + $0x228] sm:$0x1] %vm6915, 0.0
  %6940 = vst.msk [vmem:[#allocation2 + $0x240] sm:$0x1] %vm6915, 0.0
  %6941 = vst.msk [vmem:[#allocation2 + $0x258] sm:$0x1] %vm6915, 0.0
  %6942 = vst.msk [vmem:[#allocation2 + $0x270] sm:$0x1] %vm6915, 0.0
  %6943 = vst.msk [vmem:[#allocation2 + $0x288] sm:$0x1] %vm6915, 0.0
  %6944 = vst.msk [vmem:[#allocation2 + $0x2a0] sm:$0x1] %vm6915, 0.0
  %6945 = vst.msk [vmem:[#allocation2 + $0x2b8] sm:$0x1] %vm6915, 0.0
  %6946 = vst.msk [vmem:[#allocation2 + $0x2d0] sm:$0x1] %vm6915, 0.0
  %6947 = vst.msk [vmem:[#allocation2 + $0x2e8] sm:$0x1] %vm6915, 0.0
  %6948 = vst.msk [vmem:[#allocation2 + $0x300] sm:$0x1] %vm6915, 0.0
  %6949 = vst.msk [vmem:[#allocation2 + $0x318] sm:$0x1] %vm6915, 0.0
  %6950 = vst.msk [vmem:[#allocation2 + $0x330] sm:$0x1] %vm6915, 0.0
  %6951 = vst.msk [vmem:[#allocation2 + $0x348] sm:$0x1] %vm6915, 0.0
  %6952 = vst.msk [vmem:[#allocation2 + $0x11] sm:$0x1] %vm6915, 0.0
  %6953 = vst.msk [vmem:[#allocation2 + $0x29] sm:$0x1] %vm6915, 0.0
  %6954 = vst.msk [vmem:[#allocation2 + $0x41] sm:$0x1] %vm6915, 0.0
  %6955 = vst.msk [vmem:[#allocation2 + $0x59] sm:$0x1] %vm6915, 0.0
  %6956 = vst.msk [vmem:[#allocation2 + $0x71] sm:$0x1] %vm6915, 0.0
  %6957 = vst.msk [vmem:[#allocation2 + $0x89] sm:$0x1] %vm6915, 0.0
  %6958 = vst.msk [vmem:[#allocation2 + $0xa1] sm:$0x1] %vm6915, 0.0
  %6959 = vst.msk [vmem:[#allocation2 + $0xb9] sm:$0x1] %vm6915, 0.0
  %6960 = vst.msk [vmem:[#allocation2 + $0xd1] sm:$0x1] %vm6915, 0.0
  %6961 = vst.msk [vmem:[#allocation2 + $0xe9] sm:$0x1] %vm6915, 0.0
  %6962 = vst.msk [vmem:[#allocation2 + $0x101] sm:$0x1] %vm6915, 0.0
  %6963 = vst.msk [vmem:[#allocation2 + $0x119] sm:$0x1] %vm6915, 0.0
  %6964 = vst.msk [vmem:[#allocation2 + $0x131] sm:$0x1] %vm6915, 0.0
  %6965 = vst.msk [vmem:[#allocation2 + $0x149] sm:$0x1] %vm6915, 0.0
  %6966 = vst.msk [vmem:[#allocation2 + $0x161] sm:$0x1] %vm6915, 0.0
  %6967 = vst.msk [vmem:[#allocation2 + $0x179] sm:$0x1] %vm6915, 0.0
  %6968 = vst.msk [vmem:[#allocation2 + $0x191] sm:$0x1] %vm6915, 0.0
  %6969 = vst.msk [vmem:[#allocation2 + $0x1a9] sm:$0x1] %vm6915, 0.0
  %6970 = vst.msk [vmem:[#allocation2 + $0x1c1] sm:$0x1] %vm6915, 0.0
  %6971 = vst.msk [vmem:[#allocation2 + $0x1d9] sm:$0x1] %vm6915, 0.0
  %6972 = vst.msk [vmem:[#allocation2 + $0x1f1] sm:$0x1] %vm6915, 0.0
  %6973 = vst.msk [vmem:[#allocation2 + $0x209] sm:$0x1] %vm6915, 0.0
  %6974 = vst.msk [vmem:[#allocation2 + $0x221] sm:$0x1] %vm6915, 0.0
  %6975 = vst.msk [vmem:[#allocation2 + $0x239] sm:$0x1] %vm6915, 0.0
  %6976 = vst.msk [vmem:[#allocation2 + $0x251] sm:$0x1] %vm6915, 0.0
  %6977 = vst.msk [vmem:[#allocation2 + $0x269] sm:$0x1] %vm6915, 0.0
  %6978 = vst.msk [vmem:[#allocation2 + $0x281] sm:$0x1] %vm6915, 0.0
  %6979 = vst.msk [vmem:[#allocation2 + $0x299] sm:$0x1] %vm6915, 0.0
  %6980 = vst.msk [vmem:[#allocation2 + $0x2b1] sm:$0x1] %vm6915, 0.0
  %6981 = vst.msk [vmem:[#allocation2 + $0x2c9] sm:$0x1] %vm6915, 0.0
  %6982 = vst.msk [vmem:[#allocation2 + $0x2e1] sm:$0x1] %vm6915, 0.0
  %6983 = vst.msk [vmem:[#allocation2 + $0x2f9] sm:$0x1] %vm6915, 0.0
  %6984 = vst.msk [vmem:[#allocation2 + $0x311] sm:$0x1] %vm6915, 0.0
  %6985 = vst.msk [vmem:[#allocation2 + $0x329] sm:$0x1] %vm6915, 0.0
  %6986 = vst.msk [vmem:[#allocation2 + $0x341] sm:$0x1] %vm6915, 0.0
  %6987 = vst.msk [vmem:[#allocation2 + $0x359] sm:$0x1] %vm6915, 0.0
  %s6988 = scalar_lea.vmem [#allocation2], 24
  %6989 = vst.msk [vmem:[%s6988 + $0x1] sm:$0xff] %vm6360, %v6837
  %6990 = vst.msk [vmem:[%s6988 + $0x9] sm:$0xff] %vm6360, %v6838
  %6991 = vst.msk [vmem:[%s6988 + $0x19] sm:$0xff] %vm6360, %v6839
  %6992 = vst.msk [vmem:[%s6988 + $0x21] sm:$0xff] %vm6360, %v6840
  %6993 = vst.msk [vmem:[%s6988 + $0x31] sm:$0xff] %vm6360, %v6841
  %6994 = vst.msk [vmem:[%s6988 + $0x39] sm:$0xff] %vm6360, %v6842
  %6995 = vst.msk [vmem:[%s6988 + $0x49] sm:$0xff] %vm6360, %v6843
  %6996 = vst.msk [vmem:[%s6988 + $0x51] sm:$0xff] %vm6360, %v6844
  %6997 = vst.msk [vmem:[%s6988 + $0x61] sm:$0xff] %vm6360, %v6845
  %6998 = vst.msk [vmem:[%s6988 + $0x69] sm:$0xff] %vm6360, %v6846
  %6999 = vst.msk [vmem:[%s6988 + $0x79] sm:$0xff] %vm6360, %v6847
  %7000 = vst.msk [vmem:[%s6988 + $0x81] sm:$0xff] %vm6360, %v6848
  %7001 = vst.msk [vmem:[%s6988 + $0x91] sm:$0xff] %vm6360, %v6849
  %7002 = vst.msk [vmem:[%s6988 + $0x99] sm:$0xff] %vm6360, %v6850
  %7003 = vst.msk [vmem:[%s6988 + $0xa9] sm:$0xff] %vm6360, %v6851
  %7004 = vst.msk [vmem:[%s6988 + $0xb1] sm:$0xff] %vm6360, %v6852
  %7005 = vst.msk [vmem:[%s6988 + $0xc1] sm:$0xff] %vm6360, %v6853
  %7006 = vst.msk [vmem:[%s6988 + $0xc9] sm:$0xff] %vm6360, %v6854
  %7007 = vst.msk [vmem:[%s6988 + $0xd9] sm:$0xff] %vm6360, %v6855
  %7008 = vst.msk [vmem:[%s6988 + $0xe1] sm:$0xff] %vm6360, %v6856
  %7009 = vst.msk [vmem:[%s6988 + $0xf1] sm:$0xff] %vm6360, %v6857
  %7010 = vst.msk [vmem:[%s6988 + $0xf9] sm:$0xff] %vm6360, %v6858
  %7011 = vst.msk [vmem:[%s6988 + $0x109] sm:$0xff] %vm6360, %v6859
  %7012 = vst.msk [vmem:[%s6988 + $0x111] sm:$0xff] %vm6360, %v6860
  %7013 = vst.msk [vmem:[%s6988 + $0x121] sm:$0xff] %vm6360, %v6861
  %7014 = vst.msk [vmem:[%s6988 + $0x129] sm:$0xff] %vm6360, %v6862
  %7015 = vst.msk [vmem:[%s6988 + $0x139] sm:$0xff] %vm6360, %v6863
  %7016 = vst.msk [vmem:[%s6988 + $0x141] sm:$0xff] %vm6360, %v6864
  %7017 = vst.msk [vmem:[%s6988 + $0x151] sm:$0xff] %vm6360, %v6865
  %7018 = vst.msk [vmem:[%s6988 + $0x159] sm:$0xff] %vm6360, %v6866
  %7019 = vst.msk [vmem:[%s6988 + $0x169] sm:$0xff] %vm6360, %v6867
  %7020 = vst.msk [vmem:[%s6988 + $0x171] sm:$0xff] %vm6360, %v6868
  %7021 = vst.msk [vmem:[%s6988 + $0x1b1] sm:$0xff] %vm6360, %v6869
  %7022 = vst.msk [vmem:[%s6988 + $0x1b9] sm:$0xff] %vm6360, %v6870
  %7023 = vst.msk [vmem:[%s6988 + $0x1c9] sm:$0xff] %vm6360, %v6871
  %7024 = vst.msk [vmem:[%s6988 + $0x1d1] sm:$0xff] %vm6360, %v6872
  %7025 = vst.msk [vmem:[%s6988 + $0x1e1] sm:$0xff] %vm6360, %v6873
  %7026 = vst.msk [vmem:[%s6988 + $0x1e9] sm:$0xff] %vm6360, %v6874
  %7027 = vst.msk [vmem:[%s6988 + $0x1f9] sm:$0xff] %vm6360, %v6875
  %7028 = vst.msk [vmem:[%s6988 + $0x201] sm:$0xff] %vm6360, %v6876
  %7029 = vst.msk [vmem:[%s6988 + $0x211] sm:$0xff] %vm6360, %v6877
  %7030 = vst.msk [vmem:[%s6988 + $0x219] sm:$0xff] %vm6360, %v6878
  %7031 = vst.msk [vmem:[%s6988 + $0x229] sm:$0xff] %vm6360, %v6879
  %7032 = vst.msk [vmem:[%s6988 + $0x231] sm:$0xff] %vm6360, %v6880
  %7033 = vst.msk [vmem:[%s6988 + $0x241] sm:$0xff] %vm6360, %v6881
  %7034 = vst.msk [vmem:[%s6988 + $0x249] sm:$0xff] %vm6360, %v6882
  %7035 = vst.msk [vmem:[%s6988 + $0x259] sm:$0xff] %vm6360, %v6883
  %7036 = vst.msk [vmem:[%s6988 + $0x261] sm:$0xff] %vm6360, %v6884
  %7037 = vst.msk [vmem:[%s6988 + $0x271] sm:$0xff] %vm6360, %v6885
  %7038 = vst.msk [vmem:[%s6988 + $0x279] sm:$0xff] %vm6360, %v6886
  %7039 = vst.msk [vmem:[%s6988 + $0x289] sm:$0xff] %vm6360, %v6887
  %7040 = vst.msk [vmem:[%s6988 + $0x291] sm:$0xff] %vm6360, %v6888
  %7041 = vst.msk [vmem:[%s6988 + $0x2a1] sm:$0xff] %vm6360, %v6889
  %7042 = vst.msk [vmem:[%s6988 + $0x2a9] sm:$0xff] %vm6360, %v6890
  %7043 = vst.msk [vmem:[%s6988 + $0x2b9] sm:$0xff] %vm6360, %v6891
  %7044 = vst.msk [vmem:[%s6988 + $0x2c1] sm:$0xff] %vm6360, %v6892
  %7045 = vst.msk [vmem:[%s6988 + $0x2d1] sm:$0xff] %vm6360, %v6893
  %7046 = vst.msk [vmem:[%s6988 + $0x2d9] sm:$0xff] %vm6360, %v6894
  %7047 = vst.msk [vmem:[%s6988 + $0x2e9] sm:$0xff] %vm6360, %v6895
  %7048 = vst.msk [vmem:[%s6988 + $0x2f1] sm:$0xff] %vm6360, %v6896
  %7049 = vst.msk [vmem:[%s6988 + $0x301] sm:$0xff] %vm6360, %v6897
  %7050 = vst.msk [vmem:[%s6988 + $0x309] sm:$0xff] %vm6360, %v6898
  %7051 = vst.msk [vmem:[%s6988 + $0x319] sm:$0xff] %vm6360, %v6899
  %7052 = vst.msk [vmem:[%s6988 + $0x321] sm:$0xff] %vm6360, %v6900
  %v7053 = vld [vmem:[#allocation2] sm:$0xff]
  %v7054 = vld [vmem:[#allocation2 + $0x8] sm:$0xff]
  %v7055 = vld [vmem:[#allocation2 + $0x18] sm:$0xff]
  %v7056 = vld [vmem:[#allocation2 + $0x20] sm:$0xff]
  %v7057 = vld [vmem:[#allocation2 + $0x30] sm:$0xff]
  %v7058 = vld [vmem:[#allocation2 + $0x38] sm:$0xff]
  %v7059 = vld [vmem:[#allocation2 + $0x48] sm:$0xff]
  %v7060 = vld [vmem:[#allocation2 + $0x50] sm:$0xff]
  %v7061 = vld [vmem:[#allocation2 + $0x60] sm:$0xff]
  %v7062 = vld [vmem:[#allocation2 + $0x68] sm:$0xff]
  %v7063 = vld [vmem:[#allocation2 + $0x78] sm:$0xff]
  %v7064 = vld [vmem:[#allocation2 + $0x80] sm:$0xff]
  %v7065 = vld [vmem:[#allocation2 + $0x90] sm:$0xff]
  %v7066 = vld [vmem:[#allocation2 + $0x98] sm:$0xff]
  %v7067 = vld [vmem:[#allocation2 + $0xa8] sm:$0xff]
  %v7068 = vld [vmem:[#allocation2 + $0xb0] sm:$0xff]
  %v7069 = vld [vmem:[#allocation2 + $0xc0] sm:$0xff]
  %v7070 = vld [vmem:[#allocation2 + $0xc8] sm:$0xff]
  %v7071 = vld [vmem:[#allocation2 + $0xd8] sm:$0xff]
  %v7072 = vld [vmem:[#allocation2 + $0xe0] sm:$0xff]
  %v7073 = vld [vmem:[#allocation2 + $0xf0] sm:$0xff]
  %v7074 = vld [vmem:[#allocation2 + $0xf8] sm:$0xff]
  %v7075 = vld [vmem:[#allocation2 + $0x108] sm:$0xff]
  %v7076 = vld [vmem:[#allocation2 + $0x110] sm:$0xff]
  %v7077 = vld [vmem:[#allocation2 + $0x120] sm:$0xff]
  %v7078 = vld [vmem:[#allocation2 + $0x128] sm:$0xff]
  %v7079 = vld [vmem:[#allocation2 + $0x138] sm:$0xff]
  %v7080 = vld [vmem:[#allocation2 + $0x140] sm:$0xff]
  %v7081 = vld [vmem:[#allocation2 + $0x150] sm:$0xff]
  %v7082 = vld [vmem:[#allocation2 + $0x158] sm:$0xff]
  %v7083 = vld [vmem:[#allocation2 + $0x168] sm:$0xff]
  %v7084 = vld [vmem:[#allocation2 + $0x170] sm:$0xff]
  %v7085 = vld [vmem:[#allocation2 + $0x1b0] sm:$0xff]
  %v7086 = vld [vmem:[#allocation2 + $0x1b8] sm:$0xff]
  %v7087 = vld [vmem:[#allocation2 + $0x1c8] sm:$0xff]
  %v7088 = vld [vmem:[#allocation2 + $0x1d0] sm:$0xff]
  %v7089 = vld [vmem:[#allocation2 + $0x1e0] sm:$0xff]
  %v7090 = vld [vmem:[#allocation2 + $0x1e8] sm:$0xff]
  %v7091 = vld [vmem:[#allocation2 + $0x1f8] sm:$0xff]
  %v7092 = vld [vmem:[#allocation2 + $0x200] sm:$0xff]
  %v7093 = vld [vmem:[#allocation2 + $0x210] sm:$0xff]
  %v7094 = vld [vmem:[#allocation2 + $0x218] sm:$0xff]
  %v7095 = vld [vmem:[#allocation2 + $0x228] sm:$0xff]
  %v7096 = vld [vmem:[#allocation2 + $0x230] sm:$0xff]
  %v7097 = vld [vmem:[#allocation2 + $0x240] sm:$0xff]
  %v7098 = vld [vmem:[#allocation2 + $0x248] sm:$0xff]
  %v7099 = vld [vmem:[#allocation2 + $0x258] sm:$0xff]
  %v7100 = vld [vmem:[#allocation2 + $0x260] sm:$0xff]
  %v7101 = vld [vmem:[#allocation2 + $0x270] sm:$0xff]
  %v7102 = vld [vmem:[#allocation2 + $0x278] sm:$0xff]
  %v7103 = vld [vmem:[#allocation2 + $0x288] sm:$0xff]
  %v7104 = vld [vmem:[#allocation2 + $0x290] sm:$0xff]
  %v7105 = vld [vmem:[#allocation2 + $0x2a0] sm:$0xff]
  %v7106 = vld [vmem:[#allocation2 + $0x2a8] sm:$0xff]
  %v7107 = vld [vmem:[#allocation2 + $0x2b8] sm:$0xff]
  %v7108 = vld [vmem:[#allocation2 + $0x2c0] sm:$0xff]
  %v7109 = vld [vmem:[#allocation2 + $0x2d0] sm:$0xff]
  %v7110 = vld [vmem:[#allocation2 + $0x2d8] sm:$0xff]
  %v7111 = vld [vmem:[#allocation2 + $0x2e8] sm:$0xff]
  %v7112 = vld [vmem:[#allocation2 + $0x2f0] sm:$0xff]
  %v7113 = vld [vmem:[#allocation2 + $0x300] sm:$0xff]
  %v7114 = vld [vmem:[#allocation2 + $0x308] sm:$0xff]
  %v7115 = vld [vmem:[#allocation2 + $0x318] sm:$0xff]
  %v7116 = vld [vmem:[#allocation2 + $0x320] sm:$0xff]
  %v7117 = vld [vmem:[%s2] sm:$0xff]
  %v7118 = vld [vmem:[#allocation2 + $0x1] sm:$0xff]
  %v7119 = vld [vmem:[#allocation2 + $0x9] sm:$0xff]
  %v7120 = vld [vmem:[#allocation2 + $0x19] sm:$0xff]
  %v7121 = vld [vmem:[#allocation2 + $0x21] sm:$0xff]
  %v7122 = vld [vmem:[#allocation2 + $0x31] sm:$0xff]
  %v7123 = vld [vmem:[#allocation2 + $0x39] sm:$0xff]
  %v7124 = vld [vmem:[#allocation2 + $0x49] sm:$0xff]
  %v7125 = vld [vmem:[#allocation2 + $0x51] sm:$0xff]
  %v7126 = vld [vmem:[#allocation2 + $0x61] sm:$0xff]
  %v7127 = vld [vmem:[#allocation2 + $0x69] sm:$0xff]
  %v7128 = vld [vmem:[#allocation2 + $0x79] sm:$0xff]
  %v7129 = vld [vmem:[#allocation2 + $0x81] sm:$0xff]
  %v7130 = vld [vmem:[#allocation2 + $0x91] sm:$0xff]
  %v7131 = vld [vmem:[#allocation2 + $0x99] sm:$0xff]
  %v7132 = vld [vmem:[#allocation2 + $0xa9] sm:$0xff]
  %v7133 = vld [vmem:[#allocation2 + $0xb1] sm:$0xff]
  %v7134 = vld [vmem:[#allocation2 + $0xc1] sm:$0xff]
  %v7135 = vld [vmem:[#allocation2 + $0xc9] sm:$0xff]
  %v7136 = vld [vmem:[#allocation2 + $0xd9] sm:$0xff]
  %v7137 = vld [vmem:[#allocation2 + $0xe1] sm:$0xff]
  %v7138 = vld [vmem:[#allocation2 + $0xf1] sm:$0xff]
  %v7139 = vld [vmem:[#allocation2 + $0xf9] sm:$0xff]
  %v7140 = vld [vmem:[#allocation2 + $0x109] sm:$0xff]
  %v7141 = vld [vmem:[#allocation2 + $0x111] sm:$0xff]
  %v7142 = vld [vmem:[#allocation2 + $0x121] sm:$0xff]
  %v7143 = vld [vmem:[#allocation2 + $0x129] sm:$0xff]
  %v7144 = vld [vmem:[#allocation2 + $0x139] sm:$0xff]
  %v7145 = vld [vmem:[#allocation2 + $0x141] sm:$0xff]
  %v7146 = vld [vmem:[#allocation2 + $0x151] sm:$0xff]
  %v7147 = vld [vmem:[#allocation2 + $0x159] sm:$0xff]
  %v7148 = vld [vmem:[#allocation2 + $0x169] sm:$0xff]
  %v7149 = vld [vmem:[#allocation2 + $0x171] sm:$0xff]
  %v7150 = vld [vmem:[#allocation2 + $0x1b1] sm:$0xff]
  %v7151 = vld [vmem:[#allocation2 + $0x1b9] sm:$0xff]
  %v7152 = vld [vmem:[#allocation2 + $0x1c9] sm:$0xff]
  %v7153 = vld [vmem:[#allocation2 + $0x1d1] sm:$0xff]
  %v7154 = vld [vmem:[#allocation2 + $0x1e1] sm:$0xff]
  %v7155 = vld [vmem:[#allocation2 + $0x1e9] sm:$0xff]
  %v7156 = vld [vmem:[#allocation2 + $0x1f9] sm:$0xff]
  %v7157 = vld [vmem:[#allocation2 + $0x201] sm:$0xff]
  %v7158 = vld [vmem:[#allocation2 + $0x211] sm:$0xff]
  %v7159 = vld [vmem:[#allocation2 + $0x219] sm:$0xff]
  %v7160 = vld [vmem:[#allocation2 + $0x229] sm:$0xff]
  %v7161 = vld [vmem:[#allocation2 + $0x231] sm:$0xff]
  %v7162 = vld [vmem:[#allocation2 + $0x241] sm:$0xff]
  %v7163 = vld [vmem:[#allocation2 + $0x249] sm:$0xff]
  %v7164 = vld [vmem:[#allocation2 + $0x259] sm:$0xff]
  %v7165 = vld [vmem:[#allocation2 + $0x261] sm:$0xff]
  %v7166 = vld [vmem:[#allocation2 + $0x271] sm:$0xff]
  %v7167 = vld [vmem:[#allocation2 + $0x279] sm:$0xff]
  %v7168 = vld [vmem:[#allocation2 + $0x289] sm:$0xff]
  %v7169 = vld [vmem:[#allocation2 + $0x291] sm:$0xff]
  %v7170 = vld [vmem:[#allocation2 + $0x2a1] sm:$0xff]
  %v7171 = vld [vmem:[#allocation2 + $0x2a9] sm:$0xff]
  %v7172 = vld [vmem:[#allocation2 + $0x2b9] sm:$0xff]
  %v7173 = vld [vmem:[#allocation2 + $0x2c1] sm:$0xff]
  %v7174 = vld [vmem:[#allocation2 + $0x2d1] sm:$0xff]
  %v7175 = vld [vmem:[#allocation2 + $0x2d9] sm:$0xff]
  %v7176 = vld [vmem:[#allocation2 + $0x2e9] sm:$0xff]
  %v7177 = vld [vmem:[#allocation2 + $0x2f1] sm:$0xff]
  %v7178 = vld [vmem:[#allocation2 + $0x301] sm:$0xff]
  %v7179 = vld [vmem:[#allocation2 + $0x309] sm:$0xff]
  %v7180 = vld [vmem:[#allocation2 + $0x319] sm:$0xff]
  %v7181 = vld [vmem:[#allocation2 + $0x321] sm:$0xff]
  %s7182 = scalar_lea.vmem %s2, 8
  %v7183 = vld [vmem:[%s7182] sm:$0xff]
  %v7185 = vsel %vm6360, %v7118, 0
  %v7188 = vsel %vm6360, %v7119, 0
  %v7191 = vsel %vm6360, %v7120, 0
  %v7194 = vsel %vm6360, %v7121, 0
  %v7197 = vsel %vm6360, %v7122, 0
  %v7200 = vsel %vm6360, %v7123, 0
  %v7203 = vsel %vm6360, %v7124, 0
  %v7206 = vsel %vm6360, %v7125, 0
  %v7209 = vsel %vm6360, %v7126, 0
  %v7212 = vsel %vm6360, %v7127, 0
  %v7215 = vsel %vm6360, %v7128, 0
  %v7218 = vsel %vm6360, %v7129, 0
  %v7221 = vsel %vm6360, %v7130, 0
  %v7224 = vsel %vm6360, %v7131, 0
  %v7227 = vsel %vm6360, %v7132, 0
  %v7230 = vsel %vm6360, %v7133, 0
  %v7233 = vsel %vm6360, %v7134, 0
  %v7236 = vsel %vm6360, %v7135, 0
  %v7239 = vsel %vm6360, %v7136, 0
  %v7242 = vsel %vm6360, %v7137, 0
  %v7245 = vsel %vm6360, %v7138, 0
  %v7248 = vsel %vm6360, %v7139, 0
  %v7251 = vsel %vm6360, %v7140, 0
  %v7254 = vsel %vm6360, %v7141, 0
  %v7257 = vsel %vm6360, %v7142, 0
  %v7260 = vsel %vm6360, %v7143, 0
  %v7263 = vsel %vm6360, %v7144, 0
  %v7266 = vsel %vm6360, %v7145, 0
  %v7269 = vsel %vm6360, %v7146, 0
  %v7272 = vsel %vm6360, %v7147, 0
  %v7275 = vsel %vm6360, %v7148, 0
  %v7278 = vsel %vm6360, %v7149, 0
  %v7281 = vsel %vm6360, %v7150, 0
  %v7284 = vsel %vm6360, %v7151, 0
  %v7287 = vsel %vm6360, %v7152, 0
  %v7290 = vsel %vm6360, %v7153, 0
  %v7293 = vsel %vm6360, %v7154, 0
  %v7296 = vsel %vm6360, %v7155, 0
  %v7299 = vsel %vm6360, %v7156, 0
  %v7302 = vsel %vm6360, %v7157, 0
  %v7305 = vsel %vm6360, %v7158, 0
  %v7308 = vsel %vm6360, %v7159, 0
  %v7311 = vsel %vm6360, %v7160, 0
  %v7314 = vsel %vm6360, %v7161, 0
  %v7317 = vsel %vm6360, %v7162, 0
  %v7320 = vsel %vm6360, %v7163, 0
  %v7323 = vsel %vm6360, %v7164, 0
  %v7326 = vsel %vm6360, %v7165, 0
  %v7329 = vsel %vm6360, %v7166, 0
  %v7332 = vsel %vm6360, %v7167, 0
  %v7335 = vsel %vm6360, %v7168, 0
  %v7338 = vsel %vm6360, %v7169, 0
  %v7341 = vsel %vm6360, %v7170, 0
  %v7344 = vsel %vm6360, %v7171, 0
  %v7347 = vsel %vm6360, %v7172, 0
  %v7350 = vsel %vm6360, %v7173, 0
  %v7353 = vsel %vm6360, %v7174, 0
  %v7356 = vsel %vm6360, %v7175, 0
  %v7359 = vsel %vm6360, %v7176, 0
  %v7362 = vsel %vm6360, %v7177, 0
  %v7365 = vsel %vm6360, %v7178, 0
  %v7368 = vsel %vm6360, %v7179, 0
  %v7371 = vsel %vm6360, %v7180, 0
  %v7374 = vsel %vm6360, %v7181, 0
  %7376 = vmatprep.subr.mxu0 0.0
  %7377 = vmatpush1.msra.mxu0 0.0
  %7378 = vmatprep.subr.mxu0 0.0
  %7379 = vmatpush1.msra.mxu0 0.0
  %7380 = vmatprep.subr.mxu0 0.0
  %7381 = vmatpush1.msra.mxu0 0.0
  %7382 = vmatprep.subr.mxu0 0.0
  %7383 = vmatpush1.msra.mxu0 0.0
  %7384 = vmatprep.subr.mxu0 0.0
  %7385 = vmatpush1.msra.mxu0 0.0
  %7386 = vmatprep.subr.mxu0 0.0
  %7387 = vmatpush1.msra.mxu0 0.0
  %7388 = vmatprep.subr.mxu0 0.0
  %7389 = vmatpush1.msra.mxu0 0.0
  %7390 = vmatprep.subr.mxu0 0.0
  %7391 = vmatpush1.msra.mxu0 0.0
  %7392 = vmatprep.subr.mxu0 0.0
  %7393 = vmatpush1.msra.mxu0 0.0
  %7394 = vmatprep.subr.mxu0 0.0
  %7395 = vmatpush1.msra.mxu0 0.0
  %7396 = vmatprep.subr.mxu0 0.0
  %7397 = vmatpush1.msra.mxu0 0.0
  %7398 = vmatprep.subr.mxu0 0.0
  %7399 = vmatpush1.msra.mxu0 0.0
  %7400 = vmatprep.subr.mxu0 0.0
  %7401 = vmatpush1.msra.mxu0 0.0
  %7402 = vmatprep.subr.mxu0 0.0
  %7403 = vmatpush1.msra.mxu0 0.0
  %7404 = vmatprep.subr.mxu0 0.0
  %7405 = vmatpush1.msra.mxu0 0.0
  %7406 = vmatprep.subr.mxu0 0.0
  %7407 = vmatpush1.msra.mxu0 %v7183
  %7408 = vmatprep.subr.mxu0 0.0
  %7409 = vmatpush2.msra.mxu0 0.0
  %7410 = vmatprep.subr.mxu0 0.0
  %7411 = vmatpush2.msra.mxu0 0.0
  %7412 = vmatprep.subr.mxu0 0.0
  %7413 = vmatpush2.msra.mxu0 0.0
  %7414 = vmatprep.subr.mxu0 0.0
  %7415 = vmatpush2.msra.mxu0 0.0
  %7416 = vmatprep.subr.mxu0 0.0
  %7417 = vmatpush2.msra.mxu0 0.0
  %7418 = vmatprep.subr.mxu0 0.0
  %7419 = vmatpush2.msra.mxu0 0.0
  %7420 = vmatprep.subr.mxu0 0.0
  %7421 = vmatpush2.msra.mxu0 0.0
  %7422 = vmatprep.subr.mxu0 0.0
  %7423 = vmatpush2.msra.mxu0 0.0
  %7424 = vmatprep.subr.mxu0 0.0
  %7425 = vmatpush2.msra.mxu0 0.0
  %7426 = vmatprep.subr.mxu0 0.0
  %7427 = vmatpush2.msra.mxu0 0.0
  %7428 = vmatprep.subr.mxu0 0.0
  %7429 = vmatpush2.msra.mxu0 0.0
  %7430 = vmatprep.subr.mxu0 0.0
  %7431 = vmatpush2.msra.mxu0 0.0
  %7432 = vmatprep.subr.mxu0 0.0
  %7433 = vmatpush2.msra.mxu0 0.0
  %7434 = vmatprep.subr.mxu0 0.0
  %7435 = vmatpush2.msra.mxu0 0.0
  %7436 = vmatprep.subr.mxu0 0.0
  %7437 = vmatpush2.msra.mxu0 0.0
  %7438 = vmatprep.subr.mxu0 0.0
  %7439 = vmatpush2.msra.mxu0 0.0
  %7440 = vmatprep.mubr.f32.mxu0 0.0
  %7441 = vmatmul.mubr.f32.gmra.mxu0 %v7185
  %v7442 = vpop.f32.mrf.mxu0
  %v7443 = vadd.f32 0.0, %v7442
  %v7444 = vpop.f32.mrf.mxu0
  %7445 = vmatprep.mubr.f32.mxu0 0.0
  %7446 = vmatmul.mubr.f32.gmra.mxu0 %v7188
  %v7447 = vpop.f32.mrf.mxu0
  %v7448 = vadd.f32 0.0, %v7447
  %v7449 = vpop.f32.mrf.mxu0
  %7450 = vmatprep.mubr.f32.mxu0 0.0
  %7451 = vmatmul.mubr.f32.gmra.mxu0 %v7191
  %v7452 = vpop.f32.mrf.mxu0
  %v7453 = vadd.f32 0.0, %v7452
  %v7454 = vpop.f32.mrf.mxu0
  %7455 = vmatprep.mubr.f32.mxu0 0.0
  %7456 = vmatmul.mubr.f32.gmra.mxu0 %v7194
  %v7457 = vpop.f32.mrf.mxu0
  %v7458 = vadd.f32 0.0, %v7457
  %v7459 = vpop.f32.mrf.mxu0
  %7460 = vmatprep.mubr.f32.mxu0 0.0
  %7461 = vmatmul.mubr.f32.gmra.mxu0 %v7197
  %v7462 = vpop.f32.mrf.mxu0
  %v7463 = vadd.f32 0.0, %v7462
  %v7464 = vpop.f32.mrf.mxu0
  %7465 = vmatprep.mubr.f32.mxu0 0.0
  %7466 = vmatmul.mubr.f32.gmra.mxu0 %v7200
  %v7467 = vpop.f32.mrf.mxu0
  %v7468 = vadd.f32 0.0, %v7467
  %v7469 = vpop.f32.mrf.mxu0
  %7470 = vmatprep.mubr.f32.mxu0 0.0
  %7471 = vmatmul.mubr.f32.gmra.mxu0 %v7203
  %v7472 = vpop.f32.mrf.mxu0
  %v7473 = vadd.f32 0.0, %v7472
  %v7474 = vpop.f32.mrf.mxu0
  %7475 = vmatprep.mubr.f32.mxu0 0.0
  %7476 = vmatmul.mubr.f32.gmra.mxu0 %v7206
  %v7477 = vpop.f32.mrf.mxu0
  %v7478 = vadd.f32 0.0, %v7477
  %v7479 = vpop.f32.mrf.mxu0
  %7480 = vmatprep.mubr.f32.mxu0 0.0
  %7481 = vmatmul.mubr.f32.gmra.mxu0 %v7209
  %v7482 = vpop.f32.mrf.mxu0
  %v7483 = vadd.f32 0.0, %v7482
  %v7484 = vpop.f32.mrf.mxu0
  %7485 = vmatprep.mubr.f32.mxu0 0.0
  %7486 = vmatmul.mubr.f32.gmra.mxu0 %v7212
  %v7487 = vpop.f32.mrf.mxu0
  %v7488 = vadd.f32 0.0, %v7487
  %v7489 = vpop.f32.mrf.mxu0
  %7490 = vmatprep.mubr.f32.mxu0 0.0
  %7491 = vmatmul.mubr.f32.gmra.mxu0 %v7215
  %v7492 = vpop.f32.mrf.mxu0
  %v7493 = vadd.f32 0.0, %v7492
  %v7494 = vpop.f32.mrf.mxu0
  %7495 = vmatprep.mubr.f32.mxu0 0.0
  %7496 = vmatmul.mubr.f32.gmra.mxu0 %v7218
  %v7497 = vpop.f32.mrf.mxu0
  %v7498 = vadd.f32 0.0, %v7497
  %v7499 = vpop.f32.mrf.mxu0
  %7500 = vmatprep.mubr.f32.mxu0 0.0
  %7501 = vmatmul.mubr.f32.gmra.mxu0 %v7221
  %v7502 = vpop.f32.mrf.mxu0
  %v7503 = vadd.f32 0.0, %v7502
  %v7504 = vpop.f32.mrf.mxu0
  %7505 = vmatprep.mubr.f32.mxu0 0.0
  %7506 = vmatmul.mubr.f32.gmra.mxu0 %v7224
  %v7507 = vpop.f32.mrf.mxu0
  %v7508 = vadd.f32 0.0, %v7507
  %v7509 = vpop.f32.mrf.mxu0
  %7510 = vmatprep.mubr.f32.mxu0 0.0
  %7511 = vmatmul.mubr.f32.gmra.mxu0 %v7227
  %v7512 = vpop.f32.mrf.mxu0
  %v7513 = vadd.f32 0.0, %v7512
  %v7514 = vpop.f32.mrf.mxu0
  %7515 = vmatprep.mubr.f32.mxu0 0.0
  %7516 = vmatmul.mubr.f32.gmra.mxu0 %v7230
  %v7517 = vpop.f32.mrf.mxu0
  %v7518 = vadd.f32 0.0, %v7517
  %v7519 = vpop.f32.mrf.mxu0
  %7520 = vmatprep.mubr.f32.mxu0 0.0
  %7521 = vmatmul.mubr.f32.gmra.mxu0 %v7233
  %v7522 = vpop.f32.mrf.mxu0
  %v7523 = vadd.f32 0.0, %v7522
  %v7524 = vpop.f32.mrf.mxu0
  %7525 = vmatprep.mubr.f32.mxu0 0.0
  %7526 = vmatmul.mubr.f32.gmra.mxu0 %v7236
  %v7527 = vpop.f32.mrf.mxu0
  %v7528 = vadd.f32 0.0, %v7527
  %v7529 = vpop.f32.mrf.mxu0
  %7530 = vmatprep.mubr.f32.mxu0 0.0
  %7531 = vmatmul.mubr.f32.gmra.mxu0 %v7239
  %v7532 = vpop.f32.mrf.mxu0
  %v7533 = vadd.f32 0.0, %v7532
  %v7534 = vpop.f32.mrf.mxu0
  %7535 = vmatprep.mubr.f32.mxu0 0.0
  %7536 = vmatmul.mubr.f32.gmra.mxu0 %v7242
  %v7537 = vpop.f32.mrf.mxu0
  %v7538 = vadd.f32 0.0, %v7537
  %v7539 = vpop.f32.mrf.mxu0
  %7540 = vmatprep.mubr.f32.mxu0 0.0
  %7541 = vmatmul.mubr.f32.gmra.mxu0 %v7245
  %v7542 = vpop.f32.mrf.mxu0
  %v7543 = vadd.f32 0.0, %v7542
  %v7544 = vpop.f32.mrf.mxu0
  %7545 = vmatprep.mubr.f32.mxu0 0.0
  %7546 = vmatmul.mubr.f32.gmra.mxu0 %v7248
  %v7547 = vpop.f32.mrf.mxu0
  %v7548 = vadd.f32 0.0, %v7547
  %v7549 = vpop.f32.mrf.mxu0
  %7550 = vmatprep.mubr.f32.mxu0 0.0
  %7551 = vmatmul.mubr.f32.gmra.mxu0 %v7251
  %v7552 = vpop.f32.mrf.mxu0
  %v7553 = vadd.f32 0.0, %v7552
  %v7554 = vpop.f32.mrf.mxu0
  %7555 = vmatprep.mubr.f32.mxu0 0.0
  %7556 = vmatmul.mubr.f32.gmra.mxu0 %v7254
  %v7557 = vpop.f32.mrf.mxu0
  %v7558 = vadd.f32 0.0, %v7557
  %v7559 = vpop.f32.mrf.mxu0
  %7560 = vmatprep.mubr.f32.mxu0 0.0
  %7561 = vmatmul.mubr.f32.gmra.mxu0 %v7257
  %v7562 = vpop.f32.mrf.mxu0
  %v7563 = vadd.f32 0.0, %v7562
  %v7564 = vpop.f32.mrf.mxu0
  %7565 = vmatprep.mubr.f32.mxu0 0.0
  %7566 = vmatmul.mubr.f32.gmra.mxu0 %v7260
  %v7567 = vpop.f32.mrf.mxu0
  %v7568 = vadd.f32 0.0, %v7567
  %v7569 = vpop.f32.mrf.mxu0
  %7570 = vmatprep.mubr.f32.mxu0 0.0
  %7571 = vmatmul.mubr.f32.gmra.mxu0 %v7263
  %v7572 = vpop.f32.mrf.mxu0
  %v7573 = vadd.f32 0.0, %v7572
  %v7574 = vpop.f32.mrf.mxu0
  %7575 = vmatprep.mubr.f32.mxu0 0.0
  %7576 = vmatmul.mubr.f32.gmra.mxu0 %v7266
  %v7577 = vpop.f32.mrf.mxu0
  %v7578 = vadd.f32 0.0, %v7577
  %v7579 = vpop.f32.mrf.mxu0
  %7580 = vmatprep.mubr.f32.mxu0 0.0
  %7581 = vmatmul.mubr.f32.gmra.mxu0 %v7269
  %v7582 = vpop.f32.mrf.mxu0
  %v7583 = vadd.f32 0.0, %v7582
  %v7584 = vpop.f32.mrf.mxu0
  %7585 = vmatprep.mubr.f32.mxu0 0.0
  %7586 = vmatmul.mubr.f32.gmra.mxu0 %v7272
  %v7587 = vpop.f32.mrf.mxu0
  %v7588 = vadd.f32 0.0, %v7587
  %v7589 = vpop.f32.mrf.mxu0
  %7590 = vmatprep.mubr.f32.mxu0 0.0
  %7591 = vmatmul.mubr.f32.gmra.mxu0 %v7275
  %v7592 = vpop.f32.mrf.mxu0
  %v7593 = vadd.f32 0.0, %v7592
  %v7594 = vpop.f32.mrf.mxu0
  %7595 = vmatprep.mubr.f32.mxu0 0.0
  %7596 = vmatmul.mubr.f32.gmra.mxu0 %v7278
  %v7597 = vpop.f32.mrf.mxu0
  %v7598 = vadd.f32 0.0, %v7597
  %v7599 = vpop.f32.mrf.mxu0
  %7600 = vmatprep.mubr.f32.mxu0 0.0
  %7601 = vmatmul.mubr.f32.gmra.mxu0 %v7281
  %v7602 = vpop.f32.mrf.mxu0
  %v7603 = vadd.f32 0.0, %v7602
  %v7604 = vpop.f32.mrf.mxu0
  %7605 = vmatprep.mubr.f32.mxu0 0.0
  %7606 = vmatmul.mubr.f32.gmra.mxu0 %v7284
  %v7607 = vpop.f32.mrf.mxu0
  %v7608 = vadd.f32 0.0, %v7607
  %v7609 = vpop.f32.mrf.mxu0
  %7610 = vmatprep.mubr.f32.mxu0 0.0
  %7611 = vmatmul.mubr.f32.gmra.mxu0 %v7287
  %v7612 = vpop.f32.mrf.mxu0
  %v7613 = vadd.f32 0.0, %v7612
  %v7614 = vpop.f32.mrf.mxu0
  %7615 = vmatprep.mubr.f32.mxu0 0.0
  %7616 = vmatmul.mubr.f32.gmra.mxu0 %v7290
  %v7617 = vpop.f32.mrf.mxu0
  %v7618 = vadd.f32 0.0, %v7617
  %v7619 = vpop.f32.mrf.mxu0
  %7620 = vmatprep.mubr.f32.mxu0 0.0
  %7621 = vmatmul.mubr.f32.gmra.mxu0 %v7293
  %v7622 = vpop.f32.mrf.mxu0
  %v7623 = vadd.f32 0.0, %v7622
  %v7624 = vpop.f32.mrf.mxu0
  %7625 = vmatprep.mubr.f32.mxu0 0.0
  %7626 = vmatmul.mubr.f32.gmra.mxu0 %v7296
  %v7627 = vpop.f32.mrf.mxu0
  %v7628 = vadd.f32 0.0, %v7627
  %v7629 = vpop.f32.mrf.mxu0
  %7630 = vmatprep.mubr.f32.mxu0 0.0
  %7631 = vmatmul.mubr.f32.gmra.mxu0 %v7299
  %v7632 = vpop.f32.mrf.mxu0
  %v7633 = vadd.f32 0.0, %v7632
  %v7634 = vpop.f32.mrf.mxu0
  %7635 = vmatprep.mubr.f32.mxu0 0.0
  %7636 = vmatmul.mubr.f32.gmra.mxu0 %v7302
  %v7637 = vpop.f32.mrf.mxu0
  %v7638 = vadd.f32 0.0, %v7637
  %v7639 = vpop.f32.mrf.mxu0
  %7640 = vmatprep.mubr.f32.mxu0 0.0
  %7641 = vmatmul.mubr.f32.gmra.mxu0 %v7305
  %v7642 = vpop.f32.mrf.mxu0
  %v7643 = vadd.f32 0.0, %v7642
  %v7644 = vpop.f32.mrf.mxu0
  %7645 = vmatprep.mubr.f32.mxu0 0.0
  %7646 = vmatmul.mubr.f32.gmra.mxu0 %v7308
  %v7647 = vpop.f32.mrf.mxu0
  %v7648 = vadd.f32 0.0, %v7647
  %v7649 = vpop.f32.mrf.mxu0
  %7650 = vmatprep.mubr.f32.mxu0 0.0
  %7651 = vmatmul.mubr.f32.gmra.mxu0 %v7311
  %v7652 = vpop.f32.mrf.mxu0
  %v7653 = vadd.f32 0.0, %v7652
  %v7654 = vpop.f32.mrf.mxu0
  %7655 = vmatprep.mubr.f32.mxu0 0.0
  %7656 = vmatmul.mubr.f32.gmra.mxu0 %v7314
  %v7657 = vpop.f32.mrf.mxu0
  %v7658 = vadd.f32 0.0, %v7657
  %v7659 = vpop.f32.mrf.mxu0
  %7660 = vmatprep.mubr.f32.mxu0 0.0
  %7661 = vmatmul.mubr.f32.gmra.mxu0 %v7317
  %v7662 = vpop.f32.mrf.mxu0
  %v7663 = vadd.f32 0.0, %v7662
  %v7664 = vpop.f32.mrf.mxu0
  %7665 = vmatprep.mubr.f32.mxu0 0.0
  %7666 = vmatmul.mubr.f32.gmra.mxu0 %v7320
  %v7667 = vpop.f32.mrf.mxu0
  %v7668 = vadd.f32 0.0, %v7667
  %v7669 = vpop.f32.mrf.mxu0
  %7670 = vmatprep.mubr.f32.mxu0 0.0
  %7671 = vmatmul.mubr.f32.gmra.mxu0 %v7323
  %v7672 = vpop.f32.mrf.mxu0
  %v7673 = vadd.f32 0.0, %v7672
  %v7674 = vpop.f32.mrf.mxu0
  %7675 = vmatprep.mubr.f32.mxu0 0.0
  %7676 = vmatmul.mubr.f32.gmra.mxu0 %v7326
  %v7677 = vpop.f32.mrf.mxu0
  %v7678 = vadd.f32 0.0, %v7677
  %v7679 = vpop.f32.mrf.mxu0
  %7680 = vmatprep.mubr.f32.mxu0 0.0
  %7681 = vmatmul.mubr.f32.gmra.mxu0 %v7329
  %v7682 = vpop.f32.mrf.mxu0
  %v7683 = vadd.f32 0.0, %v7682
  %v7684 = vpop.f32.mrf.mxu0
  %7685 = vmatprep.mubr.f32.mxu0 0.0
  %7686 = vmatmul.mubr.f32.gmra.mxu0 %v7332
  %v7687 = vpop.f32.mrf.mxu0
  %v7688 = vadd.f32 0.0, %v7687
  %v7689 = vpop.f32.mrf.mxu0
  %7690 = vmatprep.mubr.f32.mxu0 0.0
  %7691 = vmatmul.mubr.f32.gmra.mxu0 %v7335
  %v7692 = vpop.f32.mrf.mxu0
  %v7693 = vadd.f32 0.0, %v7692
  %v7694 = vpop.f32.mrf.mxu0
  %7695 = vmatprep.mubr.f32.mxu0 0.0
  %7696 = vmatmul.mubr.f32.gmra.mxu0 %v7338
  %v7697 = vpop.f32.mrf.mxu0
  %v7698 = vadd.f32 0.0, %v7697
  %v7699 = vpop.f32.mrf.mxu0
  %7700 = vmatprep.mubr.f32.mxu0 0.0
  %7701 = vmatmul.mubr.f32.gmra.mxu0 %v7341
  %v7702 = vpop.f32.mrf.mxu0
  %v7703 = vadd.f32 0.0, %v7702
  %v7704 = vpop.f32.mrf.mxu0
  %7705 = vmatprep.mubr.f32.mxu0 0.0
  %7706 = vmatmul.mubr.f32.gmra.mxu0 %v7344
  %v7707 = vpop.f32.mrf.mxu0
  %v7708 = vadd.f32 0.0, %v7707
  %v7709 = vpop.f32.mrf.mxu0
  %7710 = vmatprep.mubr.f32.mxu0 0.0
  %7711 = vmatmul.mubr.f32.gmra.mxu0 %v7347
  %v7712 = vpop.f32.mrf.mxu0
  %v7713 = vadd.f32 0.0, %v7712
  %v7714 = vpop.f32.mrf.mxu0
  %7715 = vmatprep.mubr.f32.mxu0 0.0
  %7716 = vmatmul.mubr.f32.gmra.mxu0 %v7350
  %v7717 = vpop.f32.mrf.mxu0
  %v7718 = vadd.f32 0.0, %v7717
  %v7719 = vpop.f32.mrf.mxu0
  %7720 = vmatprep.mubr.f32.mxu0 0.0
  %7721 = vmatmul.mubr.f32.gmra.mxu0 %v7353
  %v7722 = vpop.f32.mrf.mxu0
  %v7723 = vadd.f32 0.0, %v7722
  %v7724 = vpop.f32.mrf.mxu0
  %7725 = vmatprep.mubr.f32.mxu0 0.0
  %7726 = vmatmul.mubr.f32.gmra.mxu0 %v7356
  %v7727 = vpop.f32.mrf.mxu0
  %v7728 = vadd.f32 0.0, %v7727
  %v7729 = vpop.f32.mrf.mxu0
  %7730 = vmatprep.mubr.f32.mxu0 0.0
  %7731 = vmatmul.mubr.f32.gmra.mxu0 %v7359
  %v7732 = vpop.f32.mrf.mxu0
  %v7733 = vadd.f32 0.0, %v7732
  %v7734 = vpop.f32.mrf.mxu0
  %7735 = vmatprep.mubr.f32.mxu0 0.0
  %7736 = vmatmul.mubr.f32.gmra.mxu0 %v7362
  %v7737 = vpop.f32.mrf.mxu0
  %v7738 = vadd.f32 0.0, %v7737
  %v7739 = vpop.f32.mrf.mxu0
  %7740 = vmatprep.mubr.f32.mxu0 0.0
  %7741 = vmatmul.mubr.f32.gmra.mxu0 %v7365
  %v7742 = vpop.f32.mrf.mxu0
  %v7743 = vadd.f32 0.0, %v7742
  %v7744 = vpop.f32.mrf.mxu0
  %7745 = vmatprep.mubr.f32.mxu0 0.0
  %7746 = vmatmul.mubr.f32.gmra.mxu0 %v7368
  %v7747 = vpop.f32.mrf.mxu0
  %v7748 = vadd.f32 0.0, %v7747
  %v7749 = vpop.f32.mrf.mxu0
  %7750 = vmatprep.mubr.f32.mxu0 0.0
  %7751 = vmatmul.mubr.f32.gmra.mxu0 %v7371
  %v7752 = vpop.f32.mrf.mxu0
  %v7753 = vadd.f32 0.0, %v7752
  %v7754 = vpop.f32.mrf.mxu0
  %7755 = vmatprep.mubr.f32.mxu0 0.0
  %7756 = vmatmul.mubr.f32.gmra.mxu0 %v7374
  %v7757 = vpop.f32.mrf.mxu0
  %v7758 = vadd.f32 0.0, %v7757
  %v7759 = vpop.f32.mrf.mxu0
  %7760 = vdwg.mxu0
  %v7762 = vsel %vm6360, %v7053, 0
  %v7765 = vsel %vm6360, %v7054, 0
  %v7768 = vsel %vm6360, %v7055, 0
  %v7771 = vsel %vm6360, %v7056, 0
  %v7774 = vsel %vm6360, %v7057, 0
  %v7777 = vsel %vm6360, %v7058, 0
  %v7780 = vsel %vm6360, %v7059, 0
  %v7783 = vsel %vm6360, %v7060, 0
  %v7786 = vsel %vm6360, %v7061, 0
  %v7789 = vsel %vm6360, %v7062, 0
  %v7792 = vsel %vm6360, %v7063, 0
  %v7795 = vsel %vm6360, %v7064, 0
  %v7798 = vsel %vm6360, %v7065, 0
  %v7801 = vsel %vm6360, %v7066, 0
  %v7804 = vsel %vm6360, %v7067, 0
  %v7807 = vsel %vm6360, %v7068, 0
  %v7810 = vsel %vm6360, %v7069, 0
  %v7813 = vsel %vm6360, %v7070, 0
  %v7816 = vsel %vm6360, %v7071, 0
  %v7819 = vsel %vm6360, %v7072, 0
  %v7822 = vsel %vm6360, %v7073, 0
  %v7825 = vsel %vm6360, %v7074, 0
  %v7828 = vsel %vm6360, %v7075, 0
  %v7831 = vsel %vm6360, %v7076, 0
  %v7834 = vsel %vm6360, %v7077, 0
  %v7837 = vsel %vm6360, %v7078, 0
  %v7840 = vsel %vm6360, %v7079, 0
  %v7843 = vsel %vm6360, %v7080, 0
  %v7846 = vsel %vm6360, %v7081, 0
  %v7849 = vsel %vm6360, %v7082, 0
  %v7852 = vsel %vm6360, %v7083, 0
  %v7855 = vsel %vm6360, %v7084, 0
  %v7858 = vsel %vm6360, %v7085, 0
  %v7861 = vsel %vm6360, %v7086, 0
  %v7864 = vsel %vm6360, %v7087, 0
  %v7867 = vsel %vm6360, %v7088, 0
  %v7870 = vsel %vm6360, %v7089, 0
  %v7873 = vsel %vm6360, %v7090, 0
  %v7876 = vsel %vm6360, %v7091, 0
  %v7879 = vsel %vm6360, %v7092, 0
  %v7882 = vsel %vm6360, %v7093, 0
  %v7885 = vsel %vm6360, %v7094, 0
  %v7888 = vsel %vm6360, %v7095, 0
  %v7891 = vsel %vm6360, %v7096, 0
  %v7894 = vsel %vm6360, %v7097, 0
  %v7897 = vsel %vm6360, %v7098, 0
  %v7900 = vsel %vm6360, %v7099, 0
  %v7903 = vsel %vm6360, %v7100, 0
  %v7906 = vsel %vm6360, %v7101, 0
  %v7909 = vsel %vm6360, %v7102, 0
  %v7912 = vsel %vm6360, %v7103, 0
  %v7915 = vsel %vm6360, %v7104, 0
  %v7918 = vsel %vm6360, %v7105, 0
  %v7921 = vsel %vm6360, %v7106, 0
  %v7924 = vsel %vm6360, %v7107, 0
  %v7927 = vsel %vm6360, %v7108, 0
  %v7930 = vsel %vm6360, %v7109, 0
  %v7933 = vsel %vm6360, %v7110, 0
  %v7936 = vsel %vm6360, %v7111, 0
  %v7939 = vsel %vm6360, %v7112, 0
  %v7942 = vsel %vm6360, %v7113, 0
  %v7945 = vsel %vm6360, %v7114, 0
  %v7948 = vsel %vm6360, %v7115, 0
  %v7951 = vsel %vm6360, %v7116, 0
  %7953 = vmatprep.subr.mxu0 0.0
  %7954 = vmatpush1.msra.mxu0 0.0
  %7955 = vmatprep.subr.mxu0 0.0
  %7956 = vmatpush1.msra.mxu0 0.0
  %7957 = vmatprep.subr.mxu0 0.0
  %7958 = vmatpush1.msra.mxu0 0.0
  %7959 = vmatprep.subr.mxu0 0.0
  %7960 = vmatpush1.msra.mxu0 0.0
  %7961 = vmatprep.subr.mxu0 0.0
  %7962 = vmatpush1.msra.mxu0 0.0
  %7963 = vmatprep.subr.mxu0 0.0
  %7964 = vmatpush1.msra.mxu0 0.0
  %7965 = vmatprep.subr.mxu0 0.0
  %7966 = vmatpush1.msra.mxu0 0.0
  %7967 = vmatprep.subr.mxu0 0.0
  %7968 = vmatpush1.msra.mxu0 0.0
  %7969 = vmatprep.subr.mxu0 0.0
  %7970 = vmatpush1.msra.mxu0 0.0
  %7971 = vmatprep.subr.mxu0 0.0
  %7972 = vmatpush1.msra.mxu0 0.0
  %7973 = vmatprep.subr.mxu0 0.0
  %7974 = vmatpush1.msra.mxu0 0.0
  %7975 = vmatprep.subr.mxu0 0.0
  %7976 = vmatpush1.msra.mxu0 0.0
  %7977 = vmatprep.subr.mxu0 0.0
  %7978 = vmatpush1.msra.mxu0 0.0
  %7979 = vmatprep.subr.mxu0 0.0
  %7980 = vmatpush1.msra.mxu0 0.0
  %7981 = vmatprep.subr.mxu0 0.0
  %7982 = vmatpush1.msra.mxu0 0.0
  %7983 = vmatprep.subr.mxu0 0.0
  %7984 = vmatpush1.msra.mxu0 %v7117
  %7985 = vmatprep.subr.mxu0 0.0
  %7986 = vmatpush2.msra.mxu0 0.0
  %7987 = vmatprep.subr.mxu0 0.0
  %7988 = vmatpush2.msra.mxu0 0.0
  %7989 = vmatprep.subr.mxu0 0.0
  %7990 = vmatpush2.msra.mxu0 0.0
  %7991 = vmatprep.subr.mxu0 0.0
  %7992 = vmatpush2.msra.mxu0 0.0
  %7993 = vmatprep.subr.mxu0 0.0
  %7994 = vmatpush2.msra.mxu0 0.0
  %7995 = vmatprep.subr.mxu0 0.0
  %7996 = vmatpush2.msra.mxu0 0.0
  %7997 = vmatprep.subr.mxu0 0.0
  %7998 = vmatpush2.msra.mxu0 0.0
  %7999 = vmatprep.subr.mxu0 0.0
  %8000 = vmatpush2.msra.mxu0 0.0
  %8001 = vmatprep.subr.mxu0 0.0
  %8002 = vmatpush2.msra.mxu0 0.0
  %8003 = vmatprep.subr.mxu0 0.0
  %8004 = vmatpush2.msra.mxu0 0.0
  %8005 = vmatprep.subr.mxu0 0.0
  %8006 = vmatpush2.msra.mxu0 0.0
  %8007 = vmatprep.subr.mxu0 0.0
  %8008 = vmatpush2.msra.mxu0 0.0
  %8009 = vmatprep.subr.mxu0 0.0
  %8010 = vmatpush2.msra.mxu0 0.0
  %8011 = vmatprep.subr.mxu0 0.0
  %8012 = vmatpush2.msra.mxu0 0.0
  %8013 = vmatprep.subr.mxu0 0.0
  %8014 = vmatpush2.msra.mxu0 0.0
  %8015 = vmatprep.subr.mxu0 0.0
  %8016 = vmatpush2.msra.mxu0 0.0
  %8017 = vmatprep.mubr.f32.mxu0 0.0
  %8018 = vmatmul.mubr.f32.gmra.mxu0 %v7762
  %v8019 = vpop.f32.mrf.mxu0
  %v8020 = vadd.f32 %v7443, %v8019
  %v8021 = vpop.f32.mrf.mxu0
  %8022 = vmatprep.mubr.f32.mxu0 0.0
  %8023 = vmatmul.mubr.f32.gmra.mxu0 %v7765
  %v8024 = vpop.f32.mrf.mxu0
  %v8025 = vadd.f32 %v7448, %v8024
  %v8026 = vpop.f32.mrf.mxu0
  %8027 = vmatprep.mubr.f32.mxu0 0.0
  %8028 = vmatmul.mubr.f32.gmra.mxu0 %v7768
  %v8029 = vpop.f32.mrf.mxu0
  %v8030 = vadd.f32 %v7453, %v8029
  %v8031 = vpop.f32.mrf.mxu0
  %8032 = vmatprep.mubr.f32.mxu0 0.0
  %8033 = vmatmul.mubr.f32.gmra.mxu0 %v7771
  %v8034 = vpop.f32.mrf.mxu0
  %v8035 = vadd.f32 %v7458, %v8034
  %v8036 = vpop.f32.mrf.mxu0
  %8037 = vmatprep.mubr.f32.mxu0 0.0
  %8038 = vmatmul.mubr.f32.gmra.mxu0 %v7774
  %v8039 = vpop.f32.mrf.mxu0
  %v8040 = vadd.f32 %v7463, %v8039
  %v8041 = vpop.f32.mrf.mxu0
  %8042 = vmatprep.mubr.f32.mxu0 0.0
  %8043 = vmatmul.mubr.f32.gmra.mxu0 %v7777
  %v8044 = vpop.f32.mrf.mxu0
  %v8045 = vadd.f32 %v7468, %v8044
  %v8046 = vpop.f32.mrf.mxu0
  %8047 = vmatprep.mubr.f32.mxu0 0.0
  %8048 = vmatmul.mubr.f32.gmra.mxu0 %v7780
  %v8049 = vpop.f32.mrf.mxu0
  %v8050 = vadd.f32 %v7473, %v8049
  %v8051 = vpop.f32.mrf.mxu0
  %8052 = vmatprep.mubr.f32.mxu0 0.0
  %8053 = vmatmul.mubr.f32.gmra.mxu0 %v7783
  %v8054 = vpop.f32.mrf.mxu0
  %v8055 = vadd.f32 %v7478, %v8054
  %v8056 = vpop.f32.mrf.mxu0
  %8057 = vmatprep.mubr.f32.mxu0 0.0
  %8058 = vmatmul.mubr.f32.gmra.mxu0 %v7786
  %v8059 = vpop.f32.mrf.mxu0
  %v8060 = vadd.f32 %v7483, %v8059
  %v8061 = vpop.f32.mrf.mxu0
  %8062 = vmatprep.mubr.f32.mxu0 0.0
  %8063 = vmatmul.mubr.f32.gmra.mxu0 %v7789
  %v8064 = vpop.f32.mrf.mxu0
  %v8065 = vadd.f32 %v7488, %v8064
  %v8066 = vpop.f32.mrf.mxu0
  %8067 = vmatprep.mubr.f32.mxu0 0.0
  %8068 = vmatmul.mubr.f32.gmra.mxu0 %v7792
  %v8069 = vpop.f32.mrf.mxu0
  %v8070 = vadd.f32 %v7493, %v8069
  %v8071 = vpop.f32.mrf.mxu0
  %8072 = vmatprep.mubr.f32.mxu0 0.0
  %8073 = vmatmul.mubr.f32.gmra.mxu0 %v7795
  %v8074 = vpop.f32.mrf.mxu0
  %v8075 = vadd.f32 %v7498, %v8074
  %v8076 = vpop.f32.mrf.mxu0
  %8077 = vmatprep.mubr.f32.mxu0 0.0
  %8078 = vmatmul.mubr.f32.gmra.mxu0 %v7798
  %v8079 = vpop.f32.mrf.mxu0
  %v8080 = vadd.f32 %v7503, %v8079
  %v8081 = vpop.f32.mrf.mxu0
  %8082 = vmatprep.mubr.f32.mxu0 0.0
  %8083 = vmatmul.mubr.f32.gmra.mxu0 %v7801
  %v8084 = vpop.f32.mrf.mxu0
  %v8085 = vadd.f32 %v7508, %v8084
  %v8086 = vpop.f32.mrf.mxu0
  %8087 = vmatprep.mubr.f32.mxu0 0.0
  %8088 = vmatmul.mubr.f32.gmra.mxu0 %v7804
  %v8089 = vpop.f32.mrf.mxu0
  %v8090 = vadd.f32 %v7513, %v8089
  %v8091 = vpop.f32.mrf.mxu0
  %8092 = vmatprep.mubr.f32.mxu0 0.0
  %8093 = vmatmul.mubr.f32.gmra.mxu0 %v7807
  %v8094 = vpop.f32.mrf.mxu0
  %v8095 = vadd.f32 %v7518, %v8094
  %v8096 = vpop.f32.mrf.mxu0
  %8097 = vmatprep.mubr.f32.mxu0 0.0
  %8098 = vmatmul.mubr.f32.gmra.mxu0 %v7810
  %v8099 = vpop.f32.mrf.mxu0
  %v8100 = vadd.f32 %v7523, %v8099
  %v8101 = vpop.f32.mrf.mxu0
  %8102 = vmatprep.mubr.f32.mxu0 0.0
  %8103 = vmatmul.mubr.f32.gmra.mxu0 %v7813
  %v8104 = vpop.f32.mrf.mxu0
  %v8105 = vadd.f32 %v7528, %v8104
  %v8106 = vpop.f32.mrf.mxu0
  %8107 = vmatprep.mubr.f32.mxu0 0.0
  %8108 = vmatmul.mubr.f32.gmra.mxu0 %v7816
  %v8109 = vpop.f32.mrf.mxu0
  %v8110 = vadd.f32 %v7533, %v8109
  %v8111 = vpop.f32.mrf.mxu0
  %8112 = vmatprep.mubr.f32.mxu0 0.0
  %8113 = vmatmul.mubr.f32.gmra.mxu0 %v7819
  %v8114 = vpop.f32.mrf.mxu0
  %v8115 = vadd.f32 %v7538, %v8114
  %v8116 = vpop.f32.mrf.mxu0
  %8117 = vmatprep.mubr.f32.mxu0 0.0
  %8118 = vmatmul.mubr.f32.gmra.mxu0 %v7822
  %v8119 = vpop.f32.mrf.mxu0
  %v8120 = vadd.f32 %v7543, %v8119
  %v8121 = vpop.f32.mrf.mxu0
  %8122 = vmatprep.mubr.f32.mxu0 0.0
  %8123 = vmatmul.mubr.f32.gmra.mxu0 %v7825
  %v8124 = vpop.f32.mrf.mxu0
  %v8125 = vadd.f32 %v7548, %v8124
  %v8126 = vpop.f32.mrf.mxu0
  %8127 = vmatprep.mubr.f32.mxu0 0.0
  %8128 = vmatmul.mubr.f32.gmra.mxu0 %v7828
  %v8129 = vpop.f32.mrf.mxu0
  %v8130 = vadd.f32 %v7553, %v8129
  %v8131 = vpop.f32.mrf.mxu0
  %8132 = vmatprep.mubr.f32.mxu0 0.0
  %8133 = vmatmul.mubr.f32.gmra.mxu0 %v7831
  %v8134 = vpop.f32.mrf.mxu0
  %v8135 = vadd.f32 %v7558, %v8134
  %v8136 = vpop.f32.mrf.mxu0
  %8137 = vmatprep.mubr.f32.mxu0 0.0
  %8138 = vmatmul.mubr.f32.gmra.mxu0 %v7834
  %v8139 = vpop.f32.mrf.mxu0
  %v8140 = vadd.f32 %v7563, %v8139
  %v8141 = vpop.f32.mrf.mxu0
  %8142 = vmatprep.mubr.f32.mxu0 0.0
  %8143 = vmatmul.mubr.f32.gmra.mxu0 %v7837
  %v8144 = vpop.f32.mrf.mxu0
  %v8145 = vadd.f32 %v7568, %v8144
  %v8146 = vpop.f32.mrf.mxu0
  %8147 = vmatprep.mubr.f32.mxu0 0.0
  %8148 = vmatmul.mubr.f32.gmra.mxu0 %v7840
  %v8149 = vpop.f32.mrf.mxu0
  %v8150 = vadd.f32 %v7573, %v8149
  %v8151 = vpop.f32.mrf.mxu0
  %8152 = vmatprep.mubr.f32.mxu0 0.0
  %8153 = vmatmul.mubr.f32.gmra.mxu0 %v7843
  %v8154 = vpop.f32.mrf.mxu0
  %v8155 = vadd.f32 %v7578, %v8154
  %v8156 = vpop.f32.mrf.mxu0
  %8157 = vmatprep.mubr.f32.mxu0 0.0
  %8158 = vmatmul.mubr.f32.gmra.mxu0 %v7846
  %v8159 = vpop.f32.mrf.mxu0
  %v8160 = vadd.f32 %v7583, %v8159
  %v8161 = vpop.f32.mrf.mxu0
  %8162 = vmatprep.mubr.f32.mxu0 0.0
  %8163 = vmatmul.mubr.f32.gmra.mxu0 %v7849
  %v8164 = vpop.f32.mrf.mxu0
  %v8165 = vadd.f32 %v7588, %v8164
  %v8166 = vpop.f32.mrf.mxu0
  %8167 = vmatprep.mubr.f32.mxu0 0.0
  %8168 = vmatmul.mubr.f32.gmra.mxu0 %v7852
  %v8169 = vpop.f32.mrf.mxu0
  %v8170 = vadd.f32 %v7593, %v8169
  %v8171 = vpop.f32.mrf.mxu0
  %8172 = vmatprep.mubr.f32.mxu0 0.0
  %8173 = vmatmul.mubr.f32.gmra.mxu0 %v7855
  %v8174 = vpop.f32.mrf.mxu0
  %v8175 = vadd.f32 %v7598, %v8174
  %v8176 = vpop.f32.mrf.mxu0
  %8177 = vmatprep.mubr.f32.mxu0 0.0
  %8178 = vmatmul.mubr.f32.gmra.mxu0 %v7858
  %v8179 = vpop.f32.mrf.mxu0
  %v8180 = vadd.f32 %v7603, %v8179
  %v8181 = vpop.f32.mrf.mxu0
  %8182 = vmatprep.mubr.f32.mxu0 0.0
  %8183 = vmatmul.mubr.f32.gmra.mxu0 %v7861
  %v8184 = vpop.f32.mrf.mxu0
  %v8185 = vadd.f32 %v7608, %v8184
  %v8186 = vpop.f32.mrf.mxu0
  %8187 = vmatprep.mubr.f32.mxu0 0.0
  %8188 = vmatmul.mubr.f32.gmra.mxu0 %v7864
  %v8189 = vpop.f32.mrf.mxu0
  %v8190 = vadd.f32 %v7613, %v8189
  %v8191 = vpop.f32.mrf.mxu0
  %8192 = vmatprep.mubr.f32.mxu0 0.0
  %8193 = vmatmul.mubr.f32.gmra.mxu0 %v7867
  %v8194 = vpop.f32.mrf.mxu0
  %v8195 = vadd.f32 %v7618, %v8194
  %v8196 = vpop.f32.mrf.mxu0
  %8197 = vmatprep.mubr.f32.mxu0 0.0
  %8198 = vmatmul.mubr.f32.gmra.mxu0 %v7870
  %v8199 = vpop.f32.mrf.mxu0
  %v8200 = vadd.f32 %v7623, %v8199
  %v8201 = vpop.f32.mrf.mxu0
  %8202 = vmatprep.mubr.f32.mxu0 0.0
  %8203 = vmatmul.mubr.f32.gmra.mxu0 %v7873
  %v8204 = vpop.f32.mrf.mxu0
  %v8205 = vadd.f32 %v7628, %v8204
  %v8206 = vpop.f32.mrf.mxu0
  %8207 = vmatprep.mubr.f32.mxu0 0.0
  %8208 = vmatmul.mubr.f32.gmra.mxu0 %v7876
  %v8209 = vpop.f32.mrf.mxu0
  %v8210 = vadd.f32 %v7633, %v8209
  %v8211 = vpop.f32.mrf.mxu0
  %8212 = vmatprep.mubr.f32.mxu0 0.0
  %8213 = vmatmul.mubr.f32.gmra.mxu0 %v7879
  %v8214 = vpop.f32.mrf.mxu0
  %v8215 = vadd.f32 %v7638, %v8214
  %v8216 = vpop.f32.mrf.mxu0
  %8217 = vmatprep.mubr.f32.mxu0 0.0
  %8218 = vmatmul.mubr.f32.gmra.mxu0 %v7882
  %v8219 = vpop.f32.mrf.mxu0
  %v8220 = vadd.f32 %v7643, %v8219
  %v8221 = vpop.f32.mrf.mxu0
  %8222 = vmatprep.mubr.f32.mxu0 0.0
  %8223 = vmatmul.mubr.f32.gmra.mxu0 %v7885
  %v8224 = vpop.f32.mrf.mxu0
  %v8225 = vadd.f32 %v7648, %v8224
  %v8226 = vpop.f32.mrf.mxu0
  %8227 = vmatprep.mubr.f32.mxu0 0.0
  %8228 = vmatmul.mubr.f32.gmra.mxu0 %v7888
  %v8229 = vpop.f32.mrf.mxu0
  %v8230 = vadd.f32 %v7653, %v8229
  %v8231 = vpop.f32.mrf.mxu0
  %8232 = vmatprep.mubr.f32.mxu0 0.0
  %8233 = vmatmul.mubr.f32.gmra.mxu0 %v7891
  %v8234 = vpop.f32.mrf.mxu0
  %v8235 = vadd.f32 %v7658, %v8234
  %v8236 = vpop.f32.mrf.mxu0
  %8237 = vmatprep.mubr.f32.mxu0 0.0
  %8238 = vmatmul.mubr.f32.gmra.mxu0 %v7894
  %v8239 = vpop.f32.mrf.mxu0
  %v8240 = vadd.f32 %v7663, %v8239
  %v8241 = vpop.f32.mrf.mxu0
  %8242 = vmatprep.mubr.f32.mxu0 0.0
  %8243 = vmatmul.mubr.f32.gmra.mxu0 %v7897
  %v8244 = vpop.f32.mrf.mxu0
  %v8245 = vadd.f32 %v7668, %v8244
  %v8246 = vpop.f32.mrf.mxu0
  %8247 = vmatprep.mubr.f32.mxu0 0.0
  %8248 = vmatmul.mubr.f32.gmra.mxu0 %v7900
  %v8249 = vpop.f32.mrf.mxu0
  %v8250 = vadd.f32 %v7673, %v8249
  %v8251 = vpop.f32.mrf.mxu0
  %8252 = vmatprep.mubr.f32.mxu0 0.0
  %8253 = vmatmul.mubr.f32.gmra.mxu0 %v7903
  %v8254 = vpop.f32.mrf.mxu0
  %v8255 = vadd.f32 %v7678, %v8254
  %v8256 = vpop.f32.mrf.mxu0
  %8257 = vmatprep.mubr.f32.mxu0 0.0
  %8258 = vmatmul.mubr.f32.gmra.mxu0 %v7906
  %v8259 = vpop.f32.mrf.mxu0
  %v8260 = vadd.f32 %v7683, %v8259
  %v8261 = vpop.f32.mrf.mxu0
  %8262 = vmatprep.mubr.f32.mxu0 0.0
  %8263 = vmatmul.mubr.f32.gmra.mxu0 %v7909
  %v8264 = vpop.f32.mrf.mxu0
  %v8265 = vadd.f32 %v7688, %v8264
  %v8266 = vpop.f32.mrf.mxu0
  %8267 = vmatprep.mubr.f32.mxu0 0.0
  %8268 = vmatmul.mubr.f32.gmra.mxu0 %v7912
  %v8269 = vpop.f32.mrf.mxu0
  %v8270 = vadd.f32 %v7693, %v8269
  %v8271 = vpop.f32.mrf.mxu0
  %8272 = vmatprep.mubr.f32.mxu0 0.0
  %8273 = vmatmul.mubr.f32.gmra.mxu0 %v7915
  %v8274 = vpop.f32.mrf.mxu0
  %v8275 = vadd.f32 %v7698, %v8274
  %v8276 = vpop.f32.mrf.mxu0
  %8277 = vmatprep.mubr.f32.mxu0 0.0
  %8278 = vmatmul.mubr.f32.gmra.mxu0 %v7918
  %v8279 = vpop.f32.mrf.mxu0
  %v8280 = vadd.f32 %v7703, %v8279
  %v8281 = vpop.f32.mrf.mxu0
  %8282 = vmatprep.mubr.f32.mxu0 0.0
  %8283 = vmatmul.mubr.f32.gmra.mxu0 %v7921
  %v8284 = vpop.f32.mrf.mxu0
  %v8285 = vadd.f32 %v7708, %v8284
  %v8286 = vpop.f32.mrf.mxu0
  %8287 = vmatprep.mubr.f32.mxu0 0.0
  %8288 = vmatmul.mubr.f32.gmra.mxu0 %v7924
  %v8289 = vpop.f32.mrf.mxu0
  %v8290 = vadd.f32 %v7713, %v8289
  %v8291 = vpop.f32.mrf.mxu0
  %8292 = vmatprep.mubr.f32.mxu0 0.0
  %8293 = vmatmul.mubr.f32.gmra.mxu0 %v7927
  %v8294 = vpop.f32.mrf.mxu0
  %v8295 = vadd.f32 %v7718, %v8294
  %v8296 = vpop.f32.mrf.mxu0
  %8297 = vmatprep.mubr.f32.mxu0 0.0
  %8298 = vmatmul.mubr.f32.gmra.mxu0 %v7930
  %v8299 = vpop.f32.mrf.mxu0
  %v8300 = vadd.f32 %v7723, %v8299
  %v8301 = vpop.f32.mrf.mxu0
  %8302 = vmatprep.mubr.f32.mxu0 0.0
  %8303 = vmatmul.mubr.f32.gmra.mxu0 %v7933
  %v8304 = vpop.f32.mrf.mxu0
  %v8305 = vadd.f32 %v7728, %v8304
  %v8306 = vpop.f32.mrf.mxu0
  %8307 = vmatprep.mubr.f32.mxu0 0.0
  %8308 = vmatmul.mubr.f32.gmra.mxu0 %v7936
  %v8309 = vpop.f32.mrf.mxu0
  %v8310 = vadd.f32 %v7733, %v8309
  %v8311 = vpop.f32.mrf.mxu0
  %8312 = vmatprep.mubr.f32.mxu0 0.0
  %8313 = vmatmul.mubr.f32.gmra.mxu0 %v7939
  %v8314 = vpop.f32.mrf.mxu0
  %v8315 = vadd.f32 %v7738, %v8314
  %v8316 = vpop.f32.mrf.mxu0
  %8317 = vmatprep.mubr.f32.mxu0 0.0
  %8318 = vmatmul.mubr.f32.gmra.mxu0 %v7942
  %v8319 = vpop.f32.mrf.mxu0
  %v8320 = vadd.f32 %v7743, %v8319
  %v8321 = vpop.f32.mrf.mxu0
  %8322 = vmatprep.mubr.f32.mxu0 0.0
  %8323 = vmatmul.mubr.f32.gmra.mxu0 %v7945
  %v8324 = vpop.f32.mrf.mxu0
  %v8325 = vadd.f32 %v7748, %v8324
  %v8326 = vpop.f32.mrf.mxu0
  %8327 = vmatprep.mubr.f32.mxu0 0.0
  %8328 = vmatmul.mubr.f32.gmra.mxu0 %v7948
  %v8329 = vpop.f32.mrf.mxu0
  %v8330 = vadd.f32 %v7753, %v8329
  %v8331 = vpop.f32.mrf.mxu0
  %8332 = vmatprep.mubr.f32.mxu0 0.0
  %8333 = vmatmul.mubr.f32.gmra.mxu0 %v7951
  %v8334 = vpop.f32.mrf.mxu0
  %v8335 = vadd.f32 %v7758, %v8334
  %v8336 = vpop.f32.mrf.mxu0
  %8337 = vdwg.mxu0
  %v8338 = vld [vmem:[#allocation2 + $0x2] sm:$0xff]
  %v8339 = vld [vmem:[#allocation2 + $0xa] sm:$0xff]
  %v8340 = vld [vmem:[#allocation2 + $0x1a] sm:$0xff]
  %v8341 = vld [vmem:[#allocation2 + $0x22] sm:$0xff]
  %v8342 = vld [vmem:[#allocation2 + $0x32] sm:$0xff]
  %v8343 = vld [vmem:[#allocation2 + $0x3a] sm:$0xff]
  %v8344 = vld [vmem:[#allocation2 + $0x4a] sm:$0xff]
  %v8345 = vld [vmem:[#allocation2 + $0x52] sm:$0xff]
  %v8346 = vld [vmem:[#allocation2 + $0x62] sm:$0xff]
  %v8347 = vld [vmem:[#allocation2 + $0x6a] sm:$0xff]
  %v8348 = vld [vmem:[#allocation2 + $0x7a] sm:$0xff]
  %v8349 = vld [vmem:[#allocation2 + $0x82] sm:$0xff]
  %v8350 = vld [vmem:[#allocation2 + $0x92] sm:$0xff]
  %v8351 = vld [vmem:[#allocation2 + $0x9a] sm:$0xff]
  %v8352 = vld [vmem:[#allocation2 + $0xaa] sm:$0xff]
  %v8353 = vld [vmem:[#allocation2 + $0xb2] sm:$0xff]
  %v8354 = vld [vmem:[#allocation2 + $0xc2] sm:$0xff]
  %v8355 = vld [vmem:[#allocation2 + $0xca] sm:$0xff]
  %v8356 = vld [vmem:[#allocation2 + $0xda] sm:$0xff]
  %v8357 = vld [vmem:[#allocation2 + $0xe2] sm:$0xff]
  %v8358 = vld [vmem:[#allocation2 + $0xf2] sm:$0xff]
  %v8359 = vld [vmem:[#allocation2 + $0xfa] sm:$0xff]
  %v8360 = vld [vmem:[#allocation2 + $0x10a] sm:$0xff]
  %v8361 = vld [vmem:[#allocation2 + $0x112] sm:$0xff]
  %v8362 = vld [vmem:[#allocation2 + $0x122] sm:$0xff]
  %v8363 = vld [vmem:[#allocation2 + $0x12a] sm:$0xff]
  %v8364 = vld [vmem:[#allocation2 + $0x13a] sm:$0xff]
  %v8365 = vld [vmem:[#allocation2 + $0x142] sm:$0xff]
  %v8366 = vld [vmem:[#allocation2 + $0x152] sm:$0xff]
  %v8367 = vld [vmem:[#allocation2 + $0x15a] sm:$0xff]
  %v8368 = vld [vmem:[#allocation2 + $0x16a] sm:$0xff]
  %v8369 = vld [vmem:[#allocation2 + $0x172] sm:$0xff]
  %v8370 = vld [vmem:[#allocation2 + $0x1b2] sm:$0xff]
  %v8371 = vld [vmem:[#allocation2 + $0x1ba] sm:$0xff]
  %v8372 = vld [vmem:[#allocation2 + $0x1ca] sm:$0xff]
  %v8373 = vld [vmem:[#allocation2 + $0x1d2] sm:$0xff]
  %v8374 = vld [vmem:[#allocation2 + $0x1e2] sm:$0xff]
  %v8375 = vld [vmem:[#allocation2 + $0x1ea] sm:$0xff]
  %v8376 = vld [vmem:[#allocation2 + $0x1fa] sm:$0xff]
  %v8377 = vld [vmem:[#allocation2 + $0x202] sm:$0xff]
  %v8378 = vld [vmem:[#allocation2 + $0x212] sm:$0xff]
  %v8379 = vld [vmem:[#allocation2 + $0x21a] sm:$0xff]
  %v8380 = vld [vmem:[#allocation2 + $0x22a] sm:$0xff]
  %v8381 = vld [vmem:[#allocation2 + $0x232] sm:$0xff]
  %v8382 = vld [vmem:[#allocation2 + $0x242] sm:$0xff]
  %v8383 = vld [vmem:[#allocation2 + $0x24a] sm:$0xff]
  %v8384 = vld [vmem:[#allocation2 + $0x25a] sm:$0xff]
  %v8385 = vld [vmem:[#allocation2 + $0x262] sm:$0xff]
  %v8386 = vld [vmem:[#allocation2 + $0x272] sm:$0xff]
  %v8387 = vld [vmem:[#allocation2 + $0x27a] sm:$0xff]
  %v8388 = vld [vmem:[#allocation2 + $0x28a] sm:$0xff]
  %v8389 = vld [vmem:[#allocation2 + $0x292] sm:$0xff]
  %v8390 = vld [vmem:[#allocation2 + $0x2a2] sm:$0xff]
  %v8391 = vld [vmem:[#allocation2 + $0x2aa] sm:$0xff]
  %v8392 = vld [vmem:[#allocation2 + $0x2ba] sm:$0xff]
  %v8393 = vld [vmem:[#allocation2 + $0x2c2] sm:$0xff]
  %v8394 = vld [vmem:[#allocation2 + $0x2d2] sm:$0xff]
  %v8395 = vld [vmem:[#allocation2 + $0x2da] sm:$0xff]
  %v8396 = vld [vmem:[#allocation2 + $0x2ea] sm:$0xff]
  %v8397 = vld [vmem:[#allocation2 + $0x2f2] sm:$0xff]
  %v8398 = vld [vmem:[#allocation2 + $0x302] sm:$0xff]
  %v8399 = vld [vmem:[#allocation2 + $0x30a] sm:$0xff]
  %v8400 = vld [vmem:[#allocation2 + $0x31a] sm:$0xff]
  %v8401 = vld [vmem:[#allocation2 + $0x322] sm:$0xff]
  %s8402 = scalar_lea.vmem %s2, 16
  %v8403 = vld [vmem:[%s8402] sm:$0xff]
  %v8405 = vsel %vm6360, %v8338, 0
  %v8408 = vsel %vm6360, %v8339, 0
  %v8411 = vsel %vm6360, %v8340, 0
  %v8414 = vsel %vm6360, %v8341, 0
  %v8417 = vsel %vm6360, %v8342, 0
  %v8420 = vsel %vm6360, %v8343, 0
  %v8423 = vsel %vm6360, %v8344, 0
  %v8426 = vsel %vm6360, %v8345, 0
  %v8429 = vsel %vm6360, %v8346, 0
  %v8432 = vsel %vm6360, %v8347, 0
  %v8435 = vsel %vm6360, %v8348, 0
  %v8438 = vsel %vm6360, %v8349, 0
  %v8441 = vsel %vm6360, %v8350, 0
  %v8444 = vsel %vm6360, %v8351, 0
  %v8447 = vsel %vm6360, %v8352, 0
  %v8450 = vsel %vm6360, %v8353, 0
  %v8453 = vsel %vm6360, %v8354, 0
  %v8456 = vsel %vm6360, %v8355, 0
  %v8459 = vsel %vm6360, %v8356, 0
  %v8462 = vsel %vm6360, %v8357, 0
  %v8465 = vsel %vm6360, %v8358, 0
  %v8468 = vsel %vm6360, %v8359, 0
  %v8471 = vsel %vm6360, %v8360, 0
  %v8474 = vsel %vm6360, %v8361, 0
  %v8477 = vsel %vm6360, %v8362, 0
  %v8480 = vsel %vm6360, %v8363, 0
  %v8483 = vsel %vm6360, %v8364, 0
  %v8486 = vsel %vm6360, %v8365, 0
  %v8489 = vsel %vm6360, %v8366, 0
  %v8492 = vsel %vm6360, %v8367, 0
  %v8495 = vsel %vm6360, %v8368, 0
  %v8498 = vsel %vm6360, %v8369, 0
  %v8501 = vsel %vm6360, %v8370, 0
  %v8504 = vsel %vm6360, %v8371, 0
  %v8507 = vsel %vm6360, %v8372, 0
  %v8510 = vsel %vm6360, %v8373, 0
  %v8513 = vsel %vm6360, %v8374, 0
  %v8516 = vsel %vm6360, %v8375, 0
  %v8519 = vsel %vm6360, %v8376, 0
  %v8522 = vsel %vm6360, %v8377, 0
  %v8525 = vsel %vm6360, %v8378, 0
  %v8528 = vsel %vm6360, %v8379, 0
  %v8531 = vsel %vm6360, %v8380, 0
  %v8534 = vsel %vm6360, %v8381, 0
  %v8537 = vsel %vm6360, %v8382, 0
  %v8540 = vsel %vm6360, %v8383, 0
  %v8543 = vsel %vm6360, %v8384, 0
  %v8546 = vsel %vm6360, %v8385, 0
  %v8549 = vsel %vm6360, %v8386, 0
  %v8552 = vsel %vm6360, %v8387, 0
  %v8555 = vsel %vm6360, %v8388, 0
  %v8558 = vsel %vm6360, %v8389, 0
  %v8561 = vsel %vm6360, %v8390, 0
  %v8564 = vsel %vm6360, %v8391, 0
  %v8567 = vsel %vm6360, %v8392, 0
  %v8570 = vsel %vm6360, %v8393, 0
  %v8573 = vsel %vm6360, %v8394, 0
  %v8576 = vsel %vm6360, %v8395, 0
  %v8579 = vsel %vm6360, %v8396, 0
  %v8582 = vsel %vm6360, %v8397, 0
  %v8585 = vsel %vm6360, %v8398, 0
  %v8588 = vsel %vm6360, %v8399, 0
  %v8591 = vsel %vm6360, %v8400, 0
  %v8594 = vsel %vm6360, %v8401, 0
  %8596 = vmatprep.subr.mxu0 0.0
  %8597 = vmatpush1.msra.mxu0 0.0
  %8598 = vmatprep.subr.mxu0 0.0
  %8599 = vmatpush1.msra.mxu0 0.0
  %8600 = vmatprep.subr.mxu0 0.0
  %8601 = vmatpush1.msra.mxu0 0.0
  %8602 = vmatprep.subr.mxu0 0.0
  %8603 = vmatpush1.msra.mxu0 0.0
  %8604 = vmatprep.subr.mxu0 0.0
  %8605 = vmatpush1.msra.mxu0 0.0
  %8606 = vmatprep.subr.mxu0 0.0
  %8607 = vmatpush1.msra.mxu0 0.0
  %8608 = vmatprep.subr.mxu0 0.0
  %8609 = vmatpush1.msra.mxu0 0.0
  %8610 = vmatprep.subr.mxu0 0.0
  %8611 = vmatpush1.msra.mxu0 0.0
  %8612 = vmatprep.subr.mxu0 0.0
  %8613 = vmatpush1.msra.mxu0 0.0
  %8614 = vmatprep.subr.mxu0 0.0
  %8615 = vmatpush1.msra.mxu0 0.0
  %8616 = vmatprep.subr.mxu0 0.0
  %8617 = vmatpush1.msra.mxu0 0.0
  %8618 = vmatprep.subr.mxu0 0.0
  %8619 = vmatpush1.msra.mxu0 0.0
  %8620 = vmatprep.subr.mxu0 0.0
  %8621 = vmatpush1.msra.mxu0 0.0
  %8622 = vmatprep.subr.mxu0 0.0
  %8623 = vmatpush1.msra.mxu0 0.0
  %8624 = vmatprep.subr.mxu0 0.0
  %8625 = vmatpush1.msra.mxu0 0.0
  %8626 = vmatprep.subr.mxu0 0.0
  %8627 = vmatpush1.msra.mxu0 %v8403
  %8628 = vmatprep.subr.mxu0 0.0
  %8629 = vmatpush2.msra.mxu0 0.0
  %8630 = vmatprep.subr.mxu0 0.0
  %8631 = vmatpush2.msra.mxu0 0.0
  %8632 = vmatprep.subr.mxu0 0.0
  %8633 = vmatpush2.msra.mxu0 0.0
  %8634 = vmatprep.subr.mxu0 0.0
  %8635 = vmatpush2.msra.mxu0 0.0
  %8636 = vmatprep.subr.mxu0 0.0
  %8637 = vmatpush2.msra.mxu0 0.0
  %8638 = vmatprep.subr.mxu0 0.0
  %8639 = vmatpush2.msra.mxu0 0.0
  %8640 = vmatprep.subr.mxu0 0.0
  %8641 = vmatpush2.msra.mxu0 0.0
  %8642 = vmatprep.subr.mxu0 0.0
  %8643 = vmatpush2.msra.mxu0 0.0
  %8644 = vmatprep.subr.mxu0 0.0
  %8645 = vmatpush2.msra.mxu0 0.0
  %8646 = vmatprep.subr.mxu0 0.0
  %8647 = vmatpush2.msra.mxu0 0.0
  %8648 = vmatprep.subr.mxu0 0.0
  %8649 = vmatpush2.msra.mxu0 0.0
  %8650 = vmatprep.subr.mxu0 0.0
  %8651 = vmatpush2.msra.mxu0 0.0
  %8652 = vmatprep.subr.mxu0 0.0
  %8653 = vmatpush2.msra.mxu0 0.0
  %8654 = vmatprep.subr.mxu0 0.0
  %8655 = vmatpush2.msra.mxu0 0.0
  %8656 = vmatprep.subr.mxu0 0.0
  %8657 = vmatpush2.msra.mxu0 0.0
  %8658 = vmatprep.subr.mxu0 0.0
  %8659 = vmatpush2.msra.mxu0 0.0
  %8660 = vmatprep.mubr.f32.mxu0 0.0
  %8661 = vmatmul.mubr.f32.gmra.mxu0 %v8405
  %v8662 = vpop.f32.mrf.mxu0
  %v8663 = vadd.f32 0.0, %v8662
  %v8664 = vpop.f32.mrf.mxu0
  %8665 = vmatprep.mubr.f32.mxu0 0.0
  %8666 = vmatmul.mubr.f32.gmra.mxu0 %v8408
  %v8667 = vpop.f32.mrf.mxu0
  %v8668 = vadd.f32 0.0, %v8667
  %v8669 = vpop.f32.mrf.mxu0
  %8670 = vmatprep.mubr.f32.mxu0 0.0
  %8671 = vmatmul.mubr.f32.gmra.mxu0 %v8411
  %v8672 = vpop.f32.mrf.mxu0
  %v8673 = vadd.f32 0.0, %v8672
  %v8674 = vpop.f32.mrf.mxu0
  %8675 = vmatprep.mubr.f32.mxu0 0.0
  %8676 = vmatmul.mubr.f32.gmra.mxu0 %v8414
  %v8677 = vpop.f32.mrf.mxu0
  %v8678 = vadd.f32 0.0, %v8677
  %v8679 = vpop.f32.mrf.mxu0
  %8680 = vmatprep.mubr.f32.mxu0 0.0
  %8681 = vmatmul.mubr.f32.gmra.mxu0 %v8417
  %v8682 = vpop.f32.mrf.mxu0
  %v8683 = vadd.f32 0.0, %v8682
  %v8684 = vpop.f32.mrf.mxu0
  %8685 = vmatprep.mubr.f32.mxu0 0.0
  %8686 = vmatmul.mubr.f32.gmra.mxu0 %v8420
  %v8687 = vpop.f32.mrf.mxu0
  %v8688 = vadd.f32 0.0, %v8687
  %v8689 = vpop.f32.mrf.mxu0
  %8690 = vmatprep.mubr.f32.mxu0 0.0
  %8691 = vmatmul.mubr.f32.gmra.mxu0 %v8423
  %v8692 = vpop.f32.mrf.mxu0
  %v8693 = vadd.f32 0.0, %v8692
  %v8694 = vpop.f32.mrf.mxu0
  %8695 = vmatprep.mubr.f32.mxu0 0.0
  %8696 = vmatmul.mubr.f32.gmra.mxu0 %v8426
  %v8697 = vpop.f32.mrf.mxu0
  %v8698 = vadd.f32 0.0, %v8697
  %v8699 = vpop.f32.mrf.mxu0
  %8700 = vmatprep.mubr.f32.mxu0 0.0
  %8701 = vmatmul.mubr.f32.gmra.mxu0 %v8429
  %v8702 = vpop.f32.mrf.mxu0
  %v8703 = vadd.f32 0.0, %v8702
  %v8704 = vpop.f32.mrf.mxu0
  %8705 = vmatprep.mubr.f32.mxu0 0.0
  %8706 = vmatmul.mubr.f32.gmra.mxu0 %v8432
  %v8707 = vpop.f32.mrf.mxu0
  %v8708 = vadd.f32 0.0, %v8707
  %v8709 = vpop.f32.mrf.mxu0
  %8710 = vmatprep.mubr.f32.mxu0 0.0
  %8711 = vmatmul.mubr.f32.gmra.mxu0 %v8435
  %v8712 = vpop.f32.mrf.mxu0
  %v8713 = vadd.f32 0.0, %v8712
  %v8714 = vpop.f32.mrf.mxu0
  %8715 = vmatprep.mubr.f32.mxu0 0.0
  %8716 = vmatmul.mubr.f32.gmra.mxu0 %v8438
  %v8717 = vpop.f32.mrf.mxu0
  %v8718 = vadd.f32 0.0, %v8717
  %v8719 = vpop.f32.mrf.mxu0
  %8720 = vmatprep.mubr.f32.mxu0 0.0
  %8721 = vmatmul.mubr.f32.gmra.mxu0 %v8441
  %v8722 = vpop.f32.mrf.mxu0
  %v8723 = vadd.f32 0.0, %v8722
  %v8724 = vpop.f32.mrf.mxu0
  %8725 = vmatprep.mubr.f32.mxu0 0.0
  %8726 = vmatmul.mubr.f32.gmra.mxu0 %v8444
  %v8727 = vpop.f32.mrf.mxu0
  %v8728 = vadd.f32 0.0, %v8727
  %v8729 = vpop.f32.mrf.mxu0
  %8730 = vmatprep.mubr.f32.mxu0 0.0
  %8731 = vmatmul.mubr.f32.gmra.mxu0 %v8447
  %v8732 = vpop.f32.mrf.mxu0
  %v8733 = vadd.f32 0.0, %v8732
  %v8734 = vpop.f32.mrf.mxu0
  %8735 = vmatprep.mubr.f32.mxu0 0.0
  %8736 = vmatmul.mubr.f32.gmra.mxu0 %v8450
  %v8737 = vpop.f32.mrf.mxu0
  %v8738 = vadd.f32 0.0, %v8737
  %v8739 = vpop.f32.mrf.mxu0
  %8740 = vmatprep.mubr.f32.mxu0 0.0
  %8741 = vmatmul.mubr.f32.gmra.mxu0 %v8453
  %v8742 = vpop.f32.mrf.mxu0
  %v8743 = vadd.f32 0.0, %v8742
  %v8744 = vpop.f32.mrf.mxu0
  %8745 = vmatprep.mubr.f32.mxu0 0.0
  %8746 = vmatmul.mubr.f32.gmra.mxu0 %v8456
  %v8747 = vpop.f32.mrf.mxu0
  %v8748 = vadd.f32 0.0, %v8747
  %v8749 = vpop.f32.mrf.mxu0
  %8750 = vmatprep.mubr.f32.mxu0 0.0
  %8751 = vmatmul.mubr.f32.gmra.mxu0 %v8459
  %v8752 = vpop.f32.mrf.mxu0
  %v8753 = vadd.f32 0.0, %v8752
  %v8754 = vpop.f32.mrf.mxu0
  %8755 = vmatprep.mubr.f32.mxu0 0.0
  %8756 = vmatmul.mubr.f32.gmra.mxu0 %v8462
  %v8757 = vpop.f32.mrf.mxu0
  %v8758 = vadd.f32 0.0, %v8757
  %v8759 = vpop.f32.mrf.mxu0
  %8760 = vmatprep.mubr.f32.mxu0 0.0
  %8761 = vmatmul.mubr.f32.gmra.mxu0 %v8465
  %v8762 = vpop.f32.mrf.mxu0
  %v8763 = vadd.f32 0.0, %v8762
  %v8764 = vpop.f32.mrf.mxu0
  %8765 = vmatprep.mubr.f32.mxu0 0.0
  %8766 = vmatmul.mubr.f32.gmra.mxu0 %v8468
  %v8767 = vpop.f32.mrf.mxu0
  %v8768 = vadd.f32 0.0, %v8767
  %v8769 = vpop.f32.mrf.mxu0
  %8770 = vmatprep.mubr.f32.mxu0 0.0
  %8771 = vmatmul.mubr.f32.gmra.mxu0 %v8471
  %v8772 = vpop.f32.mrf.mxu0
  %v8773 = vadd.f32 0.0, %v8772
  %v8774 = vpop.f32.mrf.mxu0
  %8775 = vmatprep.mubr.f32.mxu0 0.0
  %8776 = vmatmul.mubr.f32.gmra.mxu0 %v8474
  %v8777 = vpop.f32.mrf.mxu0
  %v8778 = vadd.f32 0.0, %v8777
  %v8779 = vpop.f32.mrf.mxu0
  %8780 = vmatprep.mubr.f32.mxu0 0.0
  %8781 = vmatmul.mubr.f32.gmra.mxu0 %v8477
  %v8782 = vpop.f32.mrf.mxu0
  %v8783 = vadd.f32 0.0, %v8782
  %v8784 = vpop.f32.mrf.mxu0
  %8785 = vmatprep.mubr.f32.mxu0 0.0
  %8786 = vmatmul.mubr.f32.gmra.mxu0 %v8480
  %v8787 = vpop.f32.mrf.mxu0
  %v8788 = vadd.f32 0.0, %v8787
  %v8789 = vpop.f32.mrf.mxu0
  %8790 = vmatprep.mubr.f32.mxu0 0.0
  %8791 = vmatmul.mubr.f32.gmra.mxu0 %v8483
  %v8792 = vpop.f32.mrf.mxu0
  %v8793 = vadd.f32 0.0, %v8792
  %v8794 = vpop.f32.mrf.mxu0
  %8795 = vmatprep.mubr.f32.mxu0 0.0
  %8796 = vmatmul.mubr.f32.gmra.mxu0 %v8486
  %v8797 = vpop.f32.mrf.mxu0
  %v8798 = vadd.f32 0.0, %v8797
  %v8799 = vpop.f32.mrf.mxu0
  %8800 = vmatprep.mubr.f32.mxu0 0.0
  %8801 = vmatmul.mubr.f32.gmra.mxu0 %v8489
  %v8802 = vpop.f32.mrf.mxu0
  %v8803 = vadd.f32 0.0, %v8802
  %v8804 = vpop.f32.mrf.mxu0
  %8805 = vmatprep.mubr.f32.mxu0 0.0
  %8806 = vmatmul.mubr.f32.gmra.mxu0 %v8492
  %v8807 = vpop.f32.mrf.mxu0
  %v8808 = vadd.f32 0.0, %v8807
  %v8809 = vpop.f32.mrf.mxu0
  %8810 = vmatprep.mubr.f32.mxu0 0.0
  %8811 = vmatmul.mubr.f32.gmra.mxu0 %v8495
  %v8812 = vpop.f32.mrf.mxu0
  %v8813 = vadd.f32 0.0, %v8812
  %v8814 = vpop.f32.mrf.mxu0
  %8815 = vmatprep.mubr.f32.mxu0 0.0
  %8816 = vmatmul.mubr.f32.gmra.mxu0 %v8498
  %v8817 = vpop.f32.mrf.mxu0
  %v8818 = vadd.f32 0.0, %v8817
  %v8819 = vpop.f32.mrf.mxu0
  %8820 = vmatprep.mubr.f32.mxu0 0.0
  %8821 = vmatmul.mubr.f32.gmra.mxu0 %v8501
  %v8822 = vpop.f32.mrf.mxu0
  %v8823 = vadd.f32 0.0, %v8822
  %v8824 = vpop.f32.mrf.mxu0
  %8825 = vmatprep.mubr.f32.mxu0 0.0
  %8826 = vmatmul.mubr.f32.gmra.mxu0 %v8504
  %v8827 = vpop.f32.mrf.mxu0
  %v8828 = vadd.f32 0.0, %v8827
  %v8829 = vpop.f32.mrf.mxu0
  %8830 = vmatprep.mubr.f32.mxu0 0.0
  %8831 = vmatmul.mubr.f32.gmra.mxu0 %v8507
  %v8832 = vpop.f32.mrf.mxu0
  %v8833 = vadd.f32 0.0, %v8832
  %v8834 = vpop.f32.mrf.mxu0
  %8835 = vmatprep.mubr.f32.mxu0 0.0
  %8836 = vmatmul.mubr.f32.gmra.mxu0 %v8510
  %v8837 = vpop.f32.mrf.mxu0
  %v8838 = vadd.f32 0.0, %v8837
  %v8839 = vpop.f32.mrf.mxu0
  %8840 = vmatprep.mubr.f32.mxu0 0.0
  %8841 = vmatmul.mubr.f32.gmra.mxu0 %v8513
  %v8842 = vpop.f32.mrf.mxu0
  %v8843 = vadd.f32 0.0, %v8842
  %v8844 = vpop.f32.mrf.mxu0
  %8845 = vmatprep.mubr.f32.mxu0 0.0
  %8846 = vmatmul.mubr.f32.gmra.mxu0 %v8516
  %v8847 = vpop.f32.mrf.mxu0
  %v8848 = vadd.f32 0.0, %v8847
  %v8849 = vpop.f32.mrf.mxu0
  %8850 = vmatprep.mubr.f32.mxu0 0.0
  %8851 = vmatmul.mubr.f32.gmra.mxu0 %v8519
  %v8852 = vpop.f32.mrf.mxu0
  %v8853 = vadd.f32 0.0, %v8852
  %v8854 = vpop.f32.mrf.mxu0
  %8855 = vmatprep.mubr.f32.mxu0 0.0
  %8856 = vmatmul.mubr.f32.gmra.mxu0 %v8522
  %v8857 = vpop.f32.mrf.mxu0
  %v8858 = vadd.f32 0.0, %v8857
  %v8859 = vpop.f32.mrf.mxu0
  %8860 = vmatprep.mubr.f32.mxu0 0.0
  %8861 = vmatmul.mubr.f32.gmra.mxu0 %v8525
  %v8862 = vpop.f32.mrf.mxu0
  %v8863 = vadd.f32 0.0, %v8862
  %v8864 = vpop.f32.mrf.mxu0
  %8865 = vmatprep.mubr.f32.mxu0 0.0
  %8866 = vmatmul.mubr.f32.gmra.mxu0 %v8528
  %v8867 = vpop.f32.mrf.mxu0
  %v8868 = vadd.f32 0.0, %v8867
  %v8869 = vpop.f32.mrf.mxu0
  %8870 = vmatprep.mubr.f32.mxu0 0.0
  %8871 = vmatmul.mubr.f32.gmra.mxu0 %v8531
  %v8872 = vpop.f32.mrf.mxu0
  %v8873 = vadd.f32 0.0, %v8872
  %v8874 = vpop.f32.mrf.mxu0
  %8875 = vmatprep.mubr.f32.mxu0 0.0
  %8876 = vmatmul.mubr.f32.gmra.mxu0 %v8534
  %v8877 = vpop.f32.mrf.mxu0
  %v8878 = vadd.f32 0.0, %v8877
  %v8879 = vpop.f32.mrf.mxu0
  %8880 = vmatprep.mubr.f32.mxu0 0.0
  %8881 = vmatmul.mubr.f32.gmra.mxu0 %v8537
  %v8882 = vpop.f32.mrf.mxu0
  %v8883 = vadd.f32 0.0, %v8882
  %v8884 = vpop.f32.mrf.mxu0
  %8885 = vmatprep.mubr.f32.mxu0 0.0
  %8886 = vmatmul.mubr.f32.gmra.mxu0 %v8540
  %v8887 = vpop.f32.mrf.mxu0
  %v8888 = vadd.f32 0.0, %v8887
  %v8889 = vpop.f32.mrf.mxu0
  %8890 = vmatprep.mubr.f32.mxu0 0.0
  %8891 = vmatmul.mubr.f32.gmra.mxu0 %v8543
  %v8892 = vpop.f32.mrf.mxu0
  %v8893 = vadd.f32 0.0, %v8892
  %v8894 = vpop.f32.mrf.mxu0
  %8895 = vmatprep.mubr.f32.mxu0 0.0
  %8896 = vmatmul.mubr.f32.gmra.mxu0 %v8546
  %v8897 = vpop.f32.mrf.mxu0
  %v8898 = vadd.f32 0.0, %v8897
  %v8899 = vpop.f32.mrf.mxu0
  %8900 = vmatprep.mubr.f32.mxu0 0.0
  %8901 = vmatmul.mubr.f32.gmra.mxu0 %v8549
  %v8902 = vpop.f32.mrf.mxu0
  %v8903 = vadd.f32 0.0, %v8902
  %v8904 = vpop.f32.mrf.mxu0
  %8905 = vmatprep.mubr.f32.mxu0 0.0
  %8906 = vmatmul.mubr.f32.gmra.mxu0 %v8552
  %v8907 = vpop.f32.mrf.mxu0
  %v8908 = vadd.f32 0.0, %v8907
  %v8909 = vpop.f32.mrf.mxu0
  %8910 = vmatprep.mubr.f32.mxu0 0.0
  %8911 = vmatmul.mubr.f32.gmra.mxu0 %v8555
  %v8912 = vpop.f32.mrf.mxu0
  %v8913 = vadd.f32 0.0, %v8912
  %v8914 = vpop.f32.mrf.mxu0
  %8915 = vmatprep.mubr.f32.mxu0 0.0
  %8916 = vmatmul.mubr.f32.gmra.mxu0 %v8558
  %v8917 = vpop.f32.mrf.mxu0
  %v8918 = vadd.f32 0.0, %v8917
  %v8919 = vpop.f32.mrf.mxu0
  %8920 = vmatprep.mubr.f32.mxu0 0.0
  %8921 = vmatmul.mubr.f32.gmra.mxu0 %v8561
  %v8922 = vpop.f32.mrf.mxu0
  %v8923 = vadd.f32 0.0, %v8922
  %v8924 = vpop.f32.mrf.mxu0
  %8925 = vmatprep.mubr.f32.mxu0 0.0
  %8926 = vmatmul.mubr.f32.gmra.mxu0 %v8564
  %v8927 = vpop.f32.mrf.mxu0
  %v8928 = vadd.f32 0.0, %v8927
  %v8929 = vpop.f32.mrf.mxu0
  %8930 = vmatprep.mubr.f32.mxu0 0.0
  %8931 = vmatmul.mubr.f32.gmra.mxu0 %v8567
  %v8932 = vpop.f32.mrf.mxu0
  %v8933 = vadd.f32 0.0, %v8932
  %v8934 = vpop.f32.mrf.mxu0
  %8935 = vmatprep.mubr.f32.mxu0 0.0
  %8936 = vmatmul.mubr.f32.gmra.mxu0 %v8570
  %v8937 = vpop.f32.mrf.mxu0
  %v8938 = vadd.f32 0.0, %v8937
  %v8939 = vpop.f32.mrf.mxu0
  %8940 = vmatprep.mubr.f32.mxu0 0.0
  %8941 = vmatmul.mubr.f32.gmra.mxu0 %v8573
  %v8942 = vpop.f32.mrf.mxu0
  %v8943 = vadd.f32 0.0, %v8942
  %v8944 = vpop.f32.mrf.mxu0
  %8945 = vmatprep.mubr.f32.mxu0 0.0
  %8946 = vmatmul.mubr.f32.gmra.mxu0 %v8576
  %v8947 = vpop.f32.mrf.mxu0
  %v8948 = vadd.f32 0.0, %v8947
  %v8949 = vpop.f32.mrf.mxu0
  %8950 = vmatprep.mubr.f32.mxu0 0.0
  %8951 = vmatmul.mubr.f32.gmra.mxu0 %v8579
  %v8952 = vpop.f32.mrf.mxu0
  %v8953 = vadd.f32 0.0, %v8952
  %v8954 = vpop.f32.mrf.mxu0
  %8955 = vmatprep.mubr.f32.mxu0 0.0
  %8956 = vmatmul.mubr.f32.gmra.mxu0 %v8582
  %v8957 = vpop.f32.mrf.mxu0
  %v8958 = vadd.f32 0.0, %v8957
  %v8959 = vpop.f32.mrf.mxu0
  %8960 = vmatprep.mubr.f32.mxu0 0.0
  %8961 = vmatmul.mubr.f32.gmra.mxu0 %v8585
  %v8962 = vpop.f32.mrf.mxu0
  %v8963 = vadd.f32 0.0, %v8962
  %v8964 = vpop.f32.mrf.mxu0
  %8965 = vmatprep.mubr.f32.mxu0 0.0
  %8966 = vmatmul.mubr.f32.gmra.mxu0 %v8588
  %v8967 = vpop.f32.mrf.mxu0
  %v8968 = vadd.f32 0.0, %v8967
  %v8969 = vpop.f32.mrf.mxu0
  %8970 = vmatprep.mubr.f32.mxu0 0.0
  %8971 = vmatmul.mubr.f32.gmra.mxu0 %v8591
  %v8972 = vpop.f32.mrf.mxu0
  %v8973 = vadd.f32 0.0, %v8972
  %v8974 = vpop.f32.mrf.mxu0
  %8975 = vmatprep.mubr.f32.mxu0 0.0
  %8976 = vmatmul.mubr.f32.gmra.mxu0 %v8594
  %v8977 = vpop.f32.mrf.mxu0
  %v8978 = vadd.f32 0.0, %v8977
  %v8979 = vpop.f32.mrf.mxu0
  %8980 = vdwg.mxu0
  %v8981 = vadd.f32 %v8020, %v8663
  %v8982 = vadd.f32 %v8025, %v8668
  %v8983 = vadd.f32 %v8030, %v8673
  %v8984 = vadd.f32 %v8035, %v8678
  %v8985 = vadd.f32 %v8040, %v8683
  %v8986 = vadd.f32 %v8045, %v8688
  %v8987 = vadd.f32 %v8050, %v8693
  %v8988 = vadd.f32 %v8055, %v8698
  %v8989 = vadd.f32 %v8060, %v8703
  %v8990 = vadd.f32 %v8065, %v8708
  %v8991 = vadd.f32 %v8070, %v8713
  %v8992 = vadd.f32 %v8075, %v8718
  %v8993 = vadd.f32 %v8080, %v8723
  %v8994 = vadd.f32 %v8085, %v8728
  %v8995 = vadd.f32 %v8090, %v8733
  %v8996 = vadd.f32 %v8095, %v8738
  %v8997 = vadd.f32 %v8100, %v8743
  %v8998 = vadd.f32 %v8105, %v8748
  %v8999 = vadd.f32 %v8110, %v8753
  %v9000 = vadd.f32 %v8115, %v8758
  %v9001 = vadd.f32 %v8120, %v8763
  %v9002 = vadd.f32 %v8125, %v8768
  %v9003 = vadd.f32 %v8130, %v8773
  %v9004 = vadd.f32 %v8135, %v8778
  %v9005 = vadd.f32 %v8140, %v8783
  %v9006 = vadd.f32 %v8145, %v8788
  %v9007 = vadd.f32 %v8150, %v8793
  %v9008 = vadd.f32 %v8155, %v8798
  %v9009 = vadd.f32 %v8160, %v8803
  %v9010 = vadd.f32 %v8165, %v8808
  %v9011 = vadd.f32 %v8170, %v8813
  %v9012 = vadd.f32 %v8175, %v8818
  %v9013 = vadd.f32 %v8180, %v8823
  %v9014 = vadd.f32 %v8185, %v8828
  %v9015 = vadd.f32 %v8190, %v8833
  %v9016 = vadd.f32 %v8195, %v8838
  %v9017 = vadd.f32 %v8200, %v8843
  %v9018 = vadd.f32 %v8205, %v8848
  %v9019 = vadd.f32 %v8210, %v8853
  %v9020 = vadd.f32 %v8215, %v8858
  %v9021 = vadd.f32 %v8220, %v8863
  %v9022 = vadd.f32 %v8225, %v8868
  %v9023 = vadd.f32 %v8230, %v8873
  %v9024 = vadd.f32 %v8235, %v8878
  %v9025 = vadd.f32 %v8240, %v8883
  %v9026 = vadd.f32 %v8245, %v8888
  %v9027 = vadd.f32 %v8250, %v8893
  %v9028 = vadd.f32 %v8255, %v8898
  %v9029 = vadd.f32 %v8260, %v8903
  %v9030 = vadd.f32 %v8265, %v8908
  %v9031 = vadd.f32 %v8270, %v8913
  %v9032 = vadd.f32 %v8275, %v8918
  %v9033 = vadd.f32 %v8280, %v8923
  %v9034 = vadd.f32 %v8285, %v8928
  %v9035 = vadd.f32 %v8290, %v8933
  %v9036 = vadd.f32 %v8295, %v8938
  %v9037 = vadd.f32 %v8300, %v8943
  %v9038 = vadd.f32 %v8305, %v8948
  %v9039 = vadd.f32 %v8310, %v8953
  %v9040 = vadd.f32 %v8315, %v8958
  %v9041 = vadd.f32 %v8320, %v8963
  %v9042 = vadd.f32 %v8325, %v8968
  %v9043 = vadd.f32 %v8330, %v8973
  %v9044 = vadd.f32 %v8335, %v8978
  %v9045 = vld [vmem:[%s6988] sm:$0xff]
  %v9046 = vld [vmem:[%s6988 + $0x8] sm:$0xff]
  %v9047 = vld [vmem:[%s6988 + $0x18] sm:$0xff]
  %v9048 = vld [vmem:[%s6988 + $0x20] sm:$0xff]
  %v9049 = vld [vmem:[%s6988 + $0x30] sm:$0xff]
  %v9050 = vld [vmem:[%s6988 + $0x38] sm:$0xff]
  %v9051 = vld [vmem:[%s6988 + $0x48] sm:$0xff]
  %v9052 = vld [vmem:[%s6988 + $0x50] sm:$0xff]
  %v9053 = vld [vmem:[%s6988 + $0x60] sm:$0xff]
  %v9054 = vld [vmem:[%s6988 + $0x68] sm:$0xff]
  %v9055 = vld [vmem:[%s6988 + $0x78] sm:$0xff]
  %v9056 = vld [vmem:[%s6988 + $0x80] sm:$0xff]
  %v9057 = vld [vmem:[%s6988 + $0x90] sm:$0xff]
  %v9058 = vld [vmem:[%s6988 + $0x98] sm:$0xff]
  %v9059 = vld [vmem:[%s6988 + $0xa8] sm:$0xff]
  %v9060 = vld [vmem:[%s6988 + $0xb0] sm:$0xff]
  %v9061 = vld [vmem:[%s6988 + $0xc0] sm:$0xff]
  %v9062 = vld [vmem:[%s6988 + $0xc8] sm:$0xff]
  %v9063 = vld [vmem:[%s6988 + $0xd8] sm:$0xff]
  %v9064 = vld [vmem:[%s6988 + $0xe0] sm:$0xff]
  %v9065 = vld [vmem:[%s6988 + $0xf0] sm:$0xff]
  %v9066 = vld [vmem:[%s6988 + $0xf8] sm:$0xff]
  %v9067 = vld [vmem:[%s6988 + $0x108] sm:$0xff]
  %v9068 = vld [vmem:[%s6988 + $0x110] sm:$0xff]
  %v9069 = vld [vmem:[%s6988 + $0x120] sm:$0xff]
  %v9070 = vld [vmem:[%s6988 + $0x128] sm:$0xff]
  %v9071 = vld [vmem:[%s6988 + $0x138] sm:$0xff]
  %v9072 = vld [vmem:[%s6988 + $0x140] sm:$0xff]
  %v9073 = vld [vmem:[%s6988 + $0x150] sm:$0xff]
  %v9074 = vld [vmem:[%s6988 + $0x158] sm:$0xff]
  %v9075 = vld [vmem:[%s6988 + $0x168] sm:$0xff]
  %v9076 = vld [vmem:[%s6988 + $0x170] sm:$0xff]
  %v9077 = vld [vmem:[%s6988 + $0x1b0] sm:$0xff]
  %v9078 = vld [vmem:[%s6988 + $0x1b8] sm:$0xff]
  %v9079 = vld [vmem:[%s6988 + $0x1c8] sm:$0xff]
  %v9080 = vld [vmem:[%s6988 + $0x1d0] sm:$0xff]
  %v9081 = vld [vmem:[%s6988 + $0x1e0] sm:$0xff]
  %v9082 = vld [vmem:[%s6988 + $0x1e8] sm:$0xff]
  %v9083 = vld [vmem:[%s6988 + $0x1f8] sm:$0xff]
  %v9084 = vld [vmem:[%s6988 + $0x200] sm:$0xff]
  %v9085 = vld [vmem:[%s6988 + $0x210] sm:$0xff]
  %v9086 = vld [vmem:[%s6988 + $0x218] sm:$0xff]
  %v9087 = vld [vmem:[%s6988 + $0x228] sm:$0xff]
  %v9088 = vld [vmem:[%s6988 + $0x230] sm:$0xff]
  %v9089 = vld [vmem:[%s6988 + $0x240] sm:$0xff]
  %v9090 = vld [vmem:[%s6988 + $0x248] sm:$0xff]
  %v9091 = vld [vmem:[%s6988 + $0x258] sm:$0xff]
  %v9092 = vld [vmem:[%s6988 + $0x260] sm:$0xff]
  %v9093 = vld [vmem:[%s6988 + $0x270] sm:$0xff]
  %v9094 = vld [vmem:[%s6988 + $0x278] sm:$0xff]
  %v9095 = vld [vmem:[%s6988 + $0x288] sm:$0xff]
  %v9096 = vld [vmem:[%s6988 + $0x290] sm:$0xff]
  %v9097 = vld [vmem:[%s6988 + $0x2a0] sm:$0xff]
  %v9098 = vld [vmem:[%s6988 + $0x2a8] sm:$0xff]
  %v9099 = vld [vmem:[%s6988 + $0x2b8] sm:$0xff]
  %v9100 = vld [vmem:[%s6988 + $0x2c0] sm:$0xff]
  %v9101 = vld [vmem:[%s6988 + $0x2d0] sm:$0xff]
  %v9102 = vld [vmem:[%s6988 + $0x2d8] sm:$0xff]
  %v9103 = vld [vmem:[%s6988 + $0x2e8] sm:$0xff]
  %v9104 = vld [vmem:[%s6988 + $0x2f0] sm:$0xff]
  %v9105 = vld [vmem:[%s6988 + $0x300] sm:$0xff]
  %v9106 = vld [vmem:[%s6988 + $0x308] sm:$0xff]
  %v9107 = vld [vmem:[%s6988 + $0x318] sm:$0xff]
  %v9108 = vld [vmem:[%s6988 + $0x320] sm:$0xff]
  %s9109 = scalar_lea.vmem %s2, 24
  %v9110 = vld [vmem:[%s9109] sm:$0xff]
  %v9112 = vsel %vm6360, %v9045, 0
  %v9115 = vsel %vm6360, %v9046, 0
  %v9118 = vsel %vm6360, %v9047, 0
  %v9121 = vsel %vm6360, %v9048, 0
  %v9124 = vsel %vm6360, %v9049, 0
  %v9127 = vsel %vm6360, %v9050, 0
  %v9130 = vsel %vm6360, %v9051, 0
  %v9133 = vsel %vm6360, %v9052, 0
  %v9136 = vsel %vm6360, %v9053, 0
  %v9139 = vsel %vm6360, %v9054, 0
  %v9142 = vsel %vm6360, %v9055, 0
  %v9145 = vsel %vm6360, %v9056, 0
  %v9148 = vsel %vm6360, %v9057, 0
  %v9151 = vsel %vm6360, %v9058, 0
  %v9154 = vsel %vm6360, %v9059, 0
  %v9157 = vsel %vm6360, %v9060, 0
  %v9160 = vsel %vm6360, %v9061, 0
  %v9163 = vsel %vm6360, %v9062, 0
  %v9166 = vsel %vm6360, %v9063, 0
  %v9169 = vsel %vm6360, %v9064, 0
  %v9172 = vsel %vm6360, %v9065, 0
  %v9175 = vsel %vm6360, %v9066, 0
  %v9178 = vsel %vm6360, %v9067, 0
  %v9181 = vsel %vm6360, %v9068, 0
  %v9184 = vsel %vm6360, %v9069, 0
  %v9187 = vsel %vm6360, %v9070, 0
  %v9190 = vsel %vm6360, %v9071, 0
  %v9193 = vsel %vm6360, %v9072, 0
  %v9196 = vsel %vm6360, %v9073, 0
  %v9199 = vsel %vm6360, %v9074, 0
  %v9202 = vsel %vm6360, %v9075, 0
  %v9205 = vsel %vm6360, %v9076, 0
  %v9208 = vsel %vm6360, %v9077, 0
  %v9211 = vsel %vm6360, %v9078, 0
  %v9214 = vsel %vm6360, %v9079, 0
  %v9217 = vsel %vm6360, %v9080, 0
  %v9220 = vsel %vm6360, %v9081, 0
  %v9223 = vsel %vm6360, %v9082, 0
  %v9226 = vsel %vm6360, %v9083, 0
  %v9229 = vsel %vm6360, %v9084, 0
  %v9232 = vsel %vm6360, %v9085, 0
  %v9235 = vsel %vm6360, %v9086, 0
  %v9238 = vsel %vm6360, %v9087, 0
  %v9241 = vsel %vm6360, %v9088, 0
  %v9244 = vsel %vm6360, %v9089, 0
  %v9247 = vsel %vm6360, %v9090, 0
  %v9250 = vsel %vm6360, %v9091, 0
  %v9253 = vsel %vm6360, %v9092, 0
  %v9256 = vsel %vm6360, %v9093, 0
  %v9259 = vsel %vm6360, %v9094, 0
  %v9262 = vsel %vm6360, %v9095, 0
  %v9265 = vsel %vm6360, %v9096, 0
  %v9268 = vsel %vm6360, %v9097, 0
  %v9271 = vsel %vm6360, %v9098, 0
  %v9274 = vsel %vm6360, %v9099, 0
  %v9277 = vsel %vm6360, %v9100, 0
  %v9280 = vsel %vm6360, %v9101, 0
  %v9283 = vsel %vm6360, %v9102, 0
  %v9286 = vsel %vm6360, %v9103, 0
  %v9289 = vsel %vm6360, %v9104, 0
  %v9292 = vsel %vm6360, %v9105, 0
  %v9295 = vsel %vm6360, %v9106, 0
  %v9298 = vsel %vm6360, %v9107, 0
  %v9301 = vsel %vm6360, %v9108, 0
  %9303 = vmatprep.subr.mxu0 0.0
  %9304 = vmatpush1.msra.mxu0 0.0
  %9305 = vmatprep.subr.mxu0 0.0
  %9306 = vmatpush1.msra.mxu0 0.0
  %9307 = vmatprep.subr.mxu0 0.0
  %9308 = vmatpush1.msra.mxu0 0.0
  %9309 = vmatprep.subr.mxu0 0.0
  %9310 = vmatpush1.msra.mxu0 0.0
  %9311 = vmatprep.subr.mxu0 0.0
  %9312 = vmatpush1.msra.mxu0 0.0
  %9313 = vmatprep.subr.mxu0 0.0
  %9314 = vmatpush1.msra.mxu0 0.0
  %9315 = vmatprep.subr.mxu0 0.0
  %9316 = vmatpush1.msra.mxu0 0.0
  %9317 = vmatprep.subr.mxu0 0.0
  %9318 = vmatpush1.msra.mxu0 0.0
  %9319 = vmatprep.subr.mxu0 0.0
  %9320 = vmatpush1.msra.mxu0 0.0
  %9321 = vmatprep.subr.mxu0 0.0
  %9322 = vmatpush1.msra.mxu0 0.0
  %9323 = vmatprep.subr.mxu0 0.0
  %9324 = vmatpush1.msra.mxu0 0.0
  %9325 = vmatprep.subr.mxu0 0.0
  %9326 = vmatpush1.msra.mxu0 0.0
  %9327 = vmatprep.subr.mxu0 0.0
  %9328 = vmatpush1.msra.mxu0 0.0
  %9329 = vmatprep.subr.mxu0 0.0
  %9330 = vmatpush1.msra.mxu0 0.0
  %9331 = vmatprep.subr.mxu0 0.0
  %9332 = vmatpush1.msra.mxu0 0.0
  %9333 = vmatprep.subr.mxu0 0.0
  %9334 = vmatpush1.msra.mxu0 %v9110
  %9335 = vmatprep.subr.mxu0 0.0
  %9336 = vmatpush2.msra.mxu0 0.0
  %9337 = vmatprep.subr.mxu0 0.0
  %9338 = vmatpush2.msra.mxu0 0.0
  %9339 = vmatprep.subr.mxu0 0.0
  %9340 = vmatpush2.msra.mxu0 0.0
  %9341 = vmatprep.subr.mxu0 0.0
  %9342 = vmatpush2.msra.mxu0 0.0
  %9343 = vmatprep.subr.mxu0 0.0
  %9344 = vmatpush2.msra.mxu0 0.0
  %9345 = vmatprep.subr.mxu0 0.0
  %9346 = vmatpush2.msra.mxu0 0.0
  %9347 = vmatprep.subr.mxu0 0.0
  %9348 = vmatpush2.msra.mxu0 0.0
  %9349 = vmatprep.subr.mxu0 0.0
  %9350 = vmatpush2.msra.mxu0 0.0
  %9351 = vmatprep.subr.mxu0 0.0
  %9352 = vmatpush2.msra.mxu0 0.0
  %9353 = vmatprep.subr.mxu0 0.0
  %9354 = vmatpush2.msra.mxu0 0.0
  %9355 = vmatprep.subr.mxu0 0.0
  %9356 = vmatpush2.msra.mxu0 0.0
  %9357 = vmatprep.subr.mxu0 0.0
  %9358 = vmatpush2.msra.mxu0 0.0
  %9359 = vmatprep.subr.mxu0 0.0
  %9360 = vmatpush2.msra.mxu0 0.0
  %9361 = vmatprep.subr.mxu0 0.0
  %9362 = vmatpush2.msra.mxu0 0.0
  %9363 = vmatprep.subr.mxu0 0.0
  %9364 = vmatpush2.msra.mxu0 0.0
  %9365 = vmatprep.subr.mxu0 0.0
  %9366 = vmatpush2.msra.mxu0 0.0
  %9367 = vmatprep.mubr.f32.mxu0 0.0
  %9368 = vmatmul.mubr.f32.gmra.mxu0 %v9112
  %v9369 = vpop.f32.mrf.mxu0
  %v9370 = vadd.f32 0.0, %v9369
  %v9371 = vpop.f32.mrf.mxu0
  %9372 = vmatprep.mubr.f32.mxu0 0.0
  %9373 = vmatmul.mubr.f32.gmra.mxu0 %v9115
  %v9374 = vpop.f32.mrf.mxu0
  %v9375 = vadd.f32 0.0, %v9374
  %v9376 = vpop.f32.mrf.mxu0
  %9377 = vmatprep.mubr.f32.mxu0 0.0
  %9378 = vmatmul.mubr.f32.gmra.mxu0 %v9118
  %v9379 = vpop.f32.mrf.mxu0
  %v9380 = vadd.f32 0.0, %v9379
  %v9381 = vpop.f32.mrf.mxu0
  %9382 = vmatprep.mubr.f32.mxu0 0.0
  %9383 = vmatmul.mubr.f32.gmra.mxu0 %v9121
  %v9384 = vpop.f32.mrf.mxu0
  %v9385 = vadd.f32 0.0, %v9384
  %v9386 = vpop.f32.mrf.mxu0
  %9387 = vmatprep.mubr.f32.mxu0 0.0
  %9388 = vmatmul.mubr.f32.gmra.mxu0 %v9124
  %v9389 = vpop.f32.mrf.mxu0
  %v9390 = vadd.f32 0.0, %v9389
  %v9391 = vpop.f32.mrf.mxu0
  %9392 = vmatprep.mubr.f32.mxu0 0.0
  %9393 = vmatmul.mubr.f32.gmra.mxu0 %v9127
  %v9394 = vpop.f32.mrf.mxu0
  %v9395 = vadd.f32 0.0, %v9394
  %v9396 = vpop.f32.mrf.mxu0
  %9397 = vmatprep.mubr.f32.mxu0 0.0
  %9398 = vmatmul.mubr.f32.gmra.mxu0 %v9130
  %v9399 = vpop.f32.mrf.mxu0
  %v9400 = vadd.f32 0.0, %v9399
  %v9401 = vpop.f32.mrf.mxu0
  %9402 = vmatprep.mubr.f32.mxu0 0.0
  %9403 = vmatmul.mubr.f32.gmra.mxu0 %v9133
  %v9404 = vpop.f32.mrf.mxu0
  %v9405 = vadd.f32 0.0, %v9404
  %v9406 = vpop.f32.mrf.mxu0
  %9407 = vmatprep.mubr.f32.mxu0 0.0
  %9408 = vmatmul.mubr.f32.gmra.mxu0 %v9136
  %v9409 = vpop.f32.mrf.mxu0
  %v9410 = vadd.f32 0.0, %v9409
  %v9411 = vpop.f32.mrf.mxu0
  %9412 = vmatprep.mubr.f32.mxu0 0.0
  %9413 = vmatmul.mubr.f32.gmra.mxu0 %v9139
  %v9414 = vpop.f32.mrf.mxu0
  %v9415 = vadd.f32 0.0, %v9414
  %v9416 = vpop.f32.mrf.mxu0
  %9417 = vmatprep.mubr.f32.mxu0 0.0
  %9418 = vmatmul.mubr.f32.gmra.mxu0 %v9142
  %v9419 = vpop.f32.mrf.mxu0
  %v9420 = vadd.f32 0.0, %v9419
  %v9421 = vpop.f32.mrf.mxu0
  %9422 = vmatprep.mubr.f32.mxu0 0.0
  %9423 = vmatmul.mubr.f32.gmra.mxu0 %v9145
  %v9424 = vpop.f32.mrf.mxu0
  %v9425 = vadd.f32 0.0, %v9424
  %v9426 = vpop.f32.mrf.mxu0
  %9427 = vmatprep.mubr.f32.mxu0 0.0
  %9428 = vmatmul.mubr.f32.gmra.mxu0 %v9148
  %v9429 = vpop.f32.mrf.mxu0
  %v9430 = vadd.f32 0.0, %v9429
  %v9431 = vpop.f32.mrf.mxu0
  %9432 = vmatprep.mubr.f32.mxu0 0.0
  %9433 = vmatmul.mubr.f32.gmra.mxu0 %v9151
  %v9434 = vpop.f32.mrf.mxu0
  %v9435 = vadd.f32 0.0, %v9434
  %v9436 = vpop.f32.mrf.mxu0
  %9437 = vmatprep.mubr.f32.mxu0 0.0
  %9438 = vmatmul.mubr.f32.gmra.mxu0 %v9154
  %v9439 = vpop.f32.mrf.mxu0
  %v9440 = vadd.f32 0.0, %v9439
  %v9441 = vpop.f32.mrf.mxu0
  %9442 = vmatprep.mubr.f32.mxu0 0.0
  %9443 = vmatmul.mubr.f32.gmra.mxu0 %v9157
  %v9444 = vpop.f32.mrf.mxu0
  %v9445 = vadd.f32 0.0, %v9444
  %v9446 = vpop.f32.mrf.mxu0
  %9447 = vmatprep.mubr.f32.mxu0 0.0
  %9448 = vmatmul.mubr.f32.gmra.mxu0 %v9160
  %v9449 = vpop.f32.mrf.mxu0
  %v9450 = vadd.f32 0.0, %v9449
  %v9451 = vpop.f32.mrf.mxu0
  %9452 = vmatprep.mubr.f32.mxu0 0.0
  %9453 = vmatmul.mubr.f32.gmra.mxu0 %v9163
  %v9454 = vpop.f32.mrf.mxu0
  %v9455 = vadd.f32 0.0, %v9454
  %v9456 = vpop.f32.mrf.mxu0
  %9457 = vmatprep.mubr.f32.mxu0 0.0
  %9458 = vmatmul.mubr.f32.gmra.mxu0 %v9166
  %v9459 = vpop.f32.mrf.mxu0
  %v9460 = vadd.f32 0.0, %v9459
  %v9461 = vpop.f32.mrf.mxu0
  %9462 = vmatprep.mubr.f32.mxu0 0.0
  %9463 = vmatmul.mubr.f32.gmra.mxu0 %v9169
  %v9464 = vpop.f32.mrf.mxu0
  %v9465 = vadd.f32 0.0, %v9464
  %v9466 = vpop.f32.mrf.mxu0
  %9467 = vmatprep.mubr.f32.mxu0 0.0
  %9468 = vmatmul.mubr.f32.gmra.mxu0 %v9172
  %v9469 = vpop.f32.mrf.mxu0
  %v9470 = vadd.f32 0.0, %v9469
  %v9471 = vpop.f32.mrf.mxu0
  %9472 = vmatprep.mubr.f32.mxu0 0.0
  %9473 = vmatmul.mubr.f32.gmra.mxu0 %v9175
  %v9474 = vpop.f32.mrf.mxu0
  %v9475 = vadd.f32 0.0, %v9474
  %v9476 = vpop.f32.mrf.mxu0
  %9477 = vmatprep.mubr.f32.mxu0 0.0
  %9478 = vmatmul.mubr.f32.gmra.mxu0 %v9178
  %v9479 = vpop.f32.mrf.mxu0
  %v9480 = vadd.f32 0.0, %v9479
  %v9481 = vpop.f32.mrf.mxu0
  %9482 = vmatprep.mubr.f32.mxu0 0.0
  %9483 = vmatmul.mubr.f32.gmra.mxu0 %v9181
  %v9484 = vpop.f32.mrf.mxu0
  %v9485 = vadd.f32 0.0, %v9484
  %v9486 = vpop.f32.mrf.mxu0
  %9487 = vmatprep.mubr.f32.mxu0 0.0
  %9488 = vmatmul.mubr.f32.gmra.mxu0 %v9184
  %v9489 = vpop.f32.mrf.mxu0
  %v9490 = vadd.f32 0.0, %v9489
  %v9491 = vpop.f32.mrf.mxu0
  %9492 = vmatprep.mubr.f32.mxu0 0.0
  %9493 = vmatmul.mubr.f32.gmra.mxu0 %v9187
  %v9494 = vpop.f32.mrf.mxu0
  %v9495 = vadd.f32 0.0, %v9494
  %v9496 = vpop.f32.mrf.mxu0
  %9497 = vmatprep.mubr.f32.mxu0 0.0
  %9498 = vmatmul.mubr.f32.gmra.mxu0 %v9190
  %v9499 = vpop.f32.mrf.mxu0
  %v9500 = vadd.f32 0.0, %v9499
  %v9501 = vpop.f32.mrf.mxu0
  %9502 = vmatprep.mubr.f32.mxu0 0.0
  %9503 = vmatmul.mubr.f32.gmra.mxu0 %v9193
  %v9504 = vpop.f32.mrf.mxu0
  %v9505 = vadd.f32 0.0, %v9504
  %v9506 = vpop.f32.mrf.mxu0
  %9507 = vmatprep.mubr.f32.mxu0 0.0
  %9508 = vmatmul.mubr.f32.gmra.mxu0 %v9196
  %v9509 = vpop.f32.mrf.mxu0
  %v9510 = vadd.f32 0.0, %v9509
  %v9511 = vpop.f32.mrf.mxu0
  %9512 = vmatprep.mubr.f32.mxu0 0.0
  %9513 = vmatmul.mubr.f32.gmra.mxu0 %v9199
  %v9514 = vpop.f32.mrf.mxu0
  %v9515 = vadd.f32 0.0, %v9514
  %v9516 = vpop.f32.mrf.mxu0
  %9517 = vmatprep.mubr.f32.mxu0 0.0
  %9518 = vmatmul.mubr.f32.gmra.mxu0 %v9202
  %v9519 = vpop.f32.mrf.mxu0
  %v9520 = vadd.f32 0.0, %v9519
  %v9521 = vpop.f32.mrf.mxu0
  %9522 = vmatprep.mubr.f32.mxu0 0.0
  %9523 = vmatmul.mubr.f32.gmra.mxu0 %v9205
  %v9524 = vpop.f32.mrf.mxu0
  %v9525 = vadd.f32 0.0, %v9524
  %v9526 = vpop.f32.mrf.mxu0
  %9527 = vmatprep.mubr.f32.mxu0 0.0
  %9528 = vmatmul.mubr.f32.gmra.mxu0 %v9208
  %v9529 = vpop.f32.mrf.mxu0
  %v9530 = vadd.f32 0.0, %v9529
  %v9531 = vpop.f32.mrf.mxu0
  %9532 = vmatprep.mubr.f32.mxu0 0.0
  %9533 = vmatmul.mubr.f32.gmra.mxu0 %v9211
  %v9534 = vpop.f32.mrf.mxu0
  %v9535 = vadd.f32 0.0, %v9534
  %v9536 = vpop.f32.mrf.mxu0
  %9537 = vmatprep.mubr.f32.mxu0 0.0
  %9538 = vmatmul.mubr.f32.gmra.mxu0 %v9214
  %v9539 = vpop.f32.mrf.mxu0
  %v9540 = vadd.f32 0.0, %v9539
  %v9541 = vpop.f32.mrf.mxu0
  %9542 = vmatprep.mubr.f32.mxu0 0.0
  %9543 = vmatmul.mubr.f32.gmra.mxu0 %v9217
  %v9544 = vpop.f32.mrf.mxu0
  %v9545 = vadd.f32 0.0, %v9544
  %v9546 = vpop.f32.mrf.mxu0
  %9547 = vmatprep.mubr.f32.mxu0 0.0
  %9548 = vmatmul.mubr.f32.gmra.mxu0 %v9220
  %v9549 = vpop.f32.mrf.mxu0
  %v9550 = vadd.f32 0.0, %v9549
  %v9551 = vpop.f32.mrf.mxu0
  %9552 = vmatprep.mubr.f32.mxu0 0.0
  %9553 = vmatmul.mubr.f32.gmra.mxu0 %v9223
  %v9554 = vpop.f32.mrf.mxu0
  %v9555 = vadd.f32 0.0, %v9554
  %v9556 = vpop.f32.mrf.mxu0
  %9557 = vmatprep.mubr.f32.mxu0 0.0
  %9558 = vmatmul.mubr.f32.gmra.mxu0 %v9226
  %v9559 = vpop.f32.mrf.mxu0
  %v9560 = vadd.f32 0.0, %v9559
  %v9561 = vpop.f32.mrf.mxu0
  %9562 = vmatprep.mubr.f32.mxu0 0.0
  %9563 = vmatmul.mubr.f32.gmra.mxu0 %v9229
  %v9564 = vpop.f32.mrf.mxu0
  %v9565 = vadd.f32 0.0, %v9564
  %v9566 = vpop.f32.mrf.mxu0
  %9567 = vmatprep.mubr.f32.mxu0 0.0
  %9568 = vmatmul.mubr.f32.gmra.mxu0 %v9232
  %v9569 = vpop.f32.mrf.mxu0
  %v9570 = vadd.f32 0.0, %v9569
  %v9571 = vpop.f32.mrf.mxu0
  %9572 = vmatprep.mubr.f32.mxu0 0.0
  %9573 = vmatmul.mubr.f32.gmra.mxu0 %v9235
  %v9574 = vpop.f32.mrf.mxu0
  %v9575 = vadd.f32 0.0, %v9574
  %v9576 = vpop.f32.mrf.mxu0
  %9577 = vmatprep.mubr.f32.mxu0 0.0
  %9578 = vmatmul.mubr.f32.gmra.mxu0 %v9238
  %v9579 = vpop.f32.mrf.mxu0
  %v9580 = vadd.f32 0.0, %v9579
  %v9581 = vpop.f32.mrf.mxu0
  %9582 = vmatprep.mubr.f32.mxu0 0.0
  %9583 = vmatmul.mubr.f32.gmra.mxu0 %v9241
  %v9584 = vpop.f32.mrf.mxu0
  %v9585 = vadd.f32 0.0, %v9584
  %v9586 = vpop.f32.mrf.mxu0
  %9587 = vmatprep.mubr.f32.mxu0 0.0
  %9588 = vmatmul.mubr.f32.gmra.mxu0 %v9244
  %v9589 = vpop.f32.mrf.mxu0
  %v9590 = vadd.f32 0.0, %v9589
  %v9591 = vpop.f32.mrf.mxu0
  %9592 = vmatprep.mubr.f32.mxu0 0.0
  %9593 = vmatmul.mubr.f32.gmra.mxu0 %v9247
  %v9594 = vpop.f32.mrf.mxu0
  %v9595 = vadd.f32 0.0, %v9594
  %v9596 = vpop.f32.mrf.mxu0
  %9597 = vmatprep.mubr.f32.mxu0 0.0
  %9598 = vmatmul.mubr.f32.gmra.mxu0 %v9250
  %v9599 = vpop.f32.mrf.mxu0
  %v9600 = vadd.f32 0.0, %v9599
  %v9601 = vpop.f32.mrf.mxu0
  %9602 = vmatprep.mubr.f32.mxu0 0.0
  %9603 = vmatmul.mubr.f32.gmra.mxu0 %v9253
  %v9604 = vpop.f32.mrf.mxu0
  %v9605 = vadd.f32 0.0, %v9604
  %v9606 = vpop.f32.mrf.mxu0
  %9607 = vmatprep.mubr.f32.mxu0 0.0
  %9608 = vmatmul.mubr.f32.gmra.mxu0 %v9256
  %v9609 = vpop.f32.mrf.mxu0
  %v9610 = vadd.f32 0.0, %v9609
  %v9611 = vpop.f32.mrf.mxu0
  %9612 = vmatprep.mubr.f32.mxu0 0.0
  %9613 = vmatmul.mubr.f32.gmra.mxu0 %v9259
  %v9614 = vpop.f32.mrf.mxu0
  %v9615 = vadd.f32 0.0, %v9614
  %v9616 = vpop.f32.mrf.mxu0
  %9617 = vmatprep.mubr.f32.mxu0 0.0
  %9618 = vmatmul.mubr.f32.gmra.mxu0 %v9262
  %v9619 = vpop.f32.mrf.mxu0
  %v9620 = vadd.f32 0.0, %v9619
  %v9621 = vpop.f32.mrf.mxu0
  %9622 = vmatprep.mubr.f32.mxu0 0.0
  %9623 = vmatmul.mubr.f32.gmra.mxu0 %v9265
  %v9624 = vpop.f32.mrf.mxu0
  %v9625 = vadd.f32 0.0, %v9624
  %v9626 = vpop.f32.mrf.mxu0
  %9627 = vmatprep.mubr.f32.mxu0 0.0
  %9628 = vmatmul.mubr.f32.gmra.mxu0 %v9268
  %v9629 = vpop.f32.mrf.mxu0
  %v9630 = vadd.f32 0.0, %v9629
  %v9631 = vpop.f32.mrf.mxu0
  %9632 = vmatprep.mubr.f32.mxu0 0.0
  %9633 = vmatmul.mubr.f32.gmra.mxu0 %v9271
  %v9634 = vpop.f32.mrf.mxu0
  %v9635 = vadd.f32 0.0, %v9634
  %v9636 = vpop.f32.mrf.mxu0
  %9637 = vmatprep.mubr.f32.mxu0 0.0
  %9638 = vmatmul.mubr.f32.gmra.mxu0 %v9274
  %v9639 = vpop.f32.mrf.mxu0
  %v9640 = vadd.f32 0.0, %v9639
  %v9641 = vpop.f32.mrf.mxu0
  %9642 = vmatprep.mubr.f32.mxu0 0.0
  %9643 = vmatmul.mubr.f32.gmra.mxu0 %v9277
  %v9644 = vpop.f32.mrf.mxu0
  %v9645 = vadd.f32 0.0, %v9644
  %v9646 = vpop.f32.mrf.mxu0
  %9647 = vmatprep.mubr.f32.mxu0 0.0
  %9648 = vmatmul.mubr.f32.gmra.mxu0 %v9280
  %v9649 = vpop.f32.mrf.mxu0
  %v9650 = vadd.f32 0.0, %v9649
  %v9651 = vpop.f32.mrf.mxu0
  %9652 = vmatprep.mubr.f32.mxu0 0.0
  %9653 = vmatmul.mubr.f32.gmra.mxu0 %v9283
  %v9654 = vpop.f32.mrf.mxu0
  %v9655 = vadd.f32 0.0, %v9654
  %v9656 = vpop.f32.mrf.mxu0
  %9657 = vmatprep.mubr.f32.mxu0 0.0
  %9658 = vmatmul.mubr.f32.gmra.mxu0 %v9286
  %v9659 = vpop.f32.mrf.mxu0
  %v9660 = vadd.f32 0.0, %v9659
  %v9661 = vpop.f32.mrf.mxu0
  %9662 = vmatprep.mubr.f32.mxu0 0.0
  %9663 = vmatmul.mubr.f32.gmra.mxu0 %v9289
  %v9664 = vpop.f32.mrf.mxu0
  %v9665 = vadd.f32 0.0, %v9664
  %v9666 = vpop.f32.mrf.mxu0
  %9667 = vmatprep.mubr.f32.mxu0 0.0
  %9668 = vmatmul.mubr.f32.gmra.mxu0 %v9292
  %v9669 = vpop.f32.mrf.mxu0
  %v9670 = vadd.f32 0.0, %v9669
  %v9671 = vpop.f32.mrf.mxu0
  %9672 = vmatprep.mubr.f32.mxu0 0.0
  %9673 = vmatmul.mubr.f32.gmra.mxu0 %v9295
  %v9674 = vpop.f32.mrf.mxu0
  %v9675 = vadd.f32 0.0, %v9674
  %v9676 = vpop.f32.mrf.mxu0
  %9677 = vmatprep.mubr.f32.mxu0 0.0
  %9678 = vmatmul.mubr.f32.gmra.mxu0 %v9298
  %v9679 = vpop.f32.mrf.mxu0
  %v9680 = vadd.f32 0.0, %v9679
  %v9681 = vpop.f32.mrf.mxu0
  %9682 = vmatprep.mubr.f32.mxu0 0.0
  %9683 = vmatmul.mubr.f32.gmra.mxu0 %v9301
  %v9684 = vpop.f32.mrf.mxu0
  %v9685 = vadd.f32 0.0, %v9684
  %v9686 = vpop.f32.mrf.mxu0
  %9687 = vdwg.mxu0
  %v9688 = vadd.f32 %v8981, %v9370
  %v9689 = vadd.f32 %v8982, %v9375
  %v9690 = vadd.f32 %v8983, %v9380
  %v9691 = vadd.f32 %v8984, %v9385
  %v9692 = vadd.f32 %v8985, %v9390
  %v9693 = vadd.f32 %v8986, %v9395
  %v9694 = vadd.f32 %v8987, %v9400
  %v9695 = vadd.f32 %v8988, %v9405
  %v9696 = vadd.f32 %v8989, %v9410
  %v9697 = vadd.f32 %v8990, %v9415
  %v9698 = vadd.f32 %v8991, %v9420
  %v9699 = vadd.f32 %v8992, %v9425
  %v9700 = vadd.f32 %v8993, %v9430
  %v9701 = vadd.f32 %v8994, %v9435
  %v9702 = vadd.f32 %v8995, %v9440
  %v9703 = vadd.f32 %v8996, %v9445
  %v9704 = vadd.f32 %v8997, %v9450
  %v9705 = vadd.f32 %v8998, %v9455
  %v9706 = vadd.f32 %v8999, %v9460
  %v9707 = vadd.f32 %v9000, %v9465
  %v9708 = vadd.f32 %v9001, %v9470
  %v9709 = vadd.f32 %v9002, %v9475
  %v9710 = vadd.f32 %v9003, %v9480
  %v9711 = vadd.f32 %v9004, %v9485
  %v9712 = vadd.f32 %v9005, %v9490
  %v9713 = vadd.f32 %v9006, %v9495
  %v9714 = vadd.f32 %v9007, %v9500
  %v9715 = vadd.f32 %v9008, %v9505
  %v9716 = vadd.f32 %v9009, %v9510
  %v9717 = vadd.f32 %v9010, %v9515
  %v9718 = vadd.f32 %v9011, %v9520
  %v9719 = vadd.f32 %v9012, %v9525
  %v9720 = vadd.f32 %v9013, %v9530
  %v9721 = vadd.f32 %v9014, %v9535
  %v9722 = vadd.f32 %v9015, %v9540
  %v9723 = vadd.f32 %v9016, %v9545
  %v9724 = vadd.f32 %v9017, %v9550
  %v9725 = vadd.f32 %v9018, %v9555
  %v9726 = vadd.f32 %v9019, %v9560
  %v9727 = vadd.f32 %v9020, %v9565
  %v9728 = vadd.f32 %v9021, %v9570
  %v9729 = vadd.f32 %v9022, %v9575
  %v9730 = vadd.f32 %v9023, %v9580
  %v9731 = vadd.f32 %v9024, %v9585
  %v9732 = vadd.f32 %v9025, %v9590
  %v9733 = vadd.f32 %v9026, %v9595
  %v9734 = vadd.f32 %v9027, %v9600
  %v9735 = vadd.f32 %v9028, %v9605
  %v9736 = vadd.f32 %v9029, %v9610
  %v9737 = vadd.f32 %v9030, %v9615
  %v9738 = vadd.f32 %v9031, %v9620
  %v9739 = vadd.f32 %v9032, %v9625
  %v9740 = vadd.f32 %v9033, %v9630
  %v9741 = vadd.f32 %v9034, %v9635
  %v9742 = vadd.f32 %v9035, %v9640
  %v9743 = vadd.f32 %v9036, %v9645
  %v9744 = vadd.f32 %v9037, %v9650
  %v9745 = vadd.f32 %v9038, %v9655
  %v9746 = vadd.f32 %v9039, %v9660
  %v9747 = vadd.f32 %v9040, %v9665
  %v9748 = vadd.f32 %v9041, %v9670
  %v9749 = vadd.f32 %v9042, %v9675
  %v9750 = vadd.f32 %v9043, %v9680
  %v9751 = vadd.f32 %v9044, %v9685
  %v9752 = vld [vmem:[%s6988 + $0x1] sm:$0xff]
  %v9753 = vld [vmem:[%s6988 + $0x9] sm:$0xff]
  %v9754 = vld [vmem:[%s6988 + $0x19] sm:$0xff]
  %v9755 = vld [vmem:[%s6988 + $0x21] sm:$0xff]
  %v9756 = vld [vmem:[%s6988 + $0x31] sm:$0xff]
  %v9757 = vld [vmem:[%s6988 + $0x39] sm:$0xff]
  %v9758 = vld [vmem:[%s6988 + $0x49] sm:$0xff]
  %v9759 = vld [vmem:[%s6988 + $0x51] sm:$0xff]
  %v9760 = vld [vmem:[%s6988 + $0x61] sm:$0xff]
  %v9761 = vld [vmem:[%s6988 + $0x69] sm:$0xff]
  %v9762 = vld [vmem:[%s6988 + $0x79] sm:$0xff]
  %v9763 = vld [vmem:[%s6988 + $0x81] sm:$0xff]
  %v9764 = vld [vmem:[%s6988 + $0x91] sm:$0xff]
  %v9765 = vld [vmem:[%s6988 + $0x99] sm:$0xff]
  %v9766 = vld [vmem:[%s6988 + $0xa9] sm:$0xff]
  %v9767 = vld [vmem:[%s6988 + $0xb1] sm:$0xff]
  %v9768 = vld [vmem:[%s6988 + $0xc1] sm:$0xff]
  %v9769 = vld [vmem:[%s6988 + $0xc9] sm:$0xff]
  %v9770 = vld [vmem:[%s6988 + $0xd9] sm:$0xff]
  %v9771 = vld [vmem:[%s6988 + $0xe1] sm:$0xff]
  %v9772 = vld [vmem:[%s6988 + $0xf1] sm:$0xff]
  %v9773 = vld [vmem:[%s6988 + $0xf9] sm:$0xff]
  %v9774 = vld [vmem:[%s6988 + $0x109] sm:$0xff]
  %v9775 = vld [vmem:[%s6988 + $0x111] sm:$0xff]
  %v9776 = vld [vmem:[%s6988 + $0x121] sm:$0xff]
  %v9777 = vld [vmem:[%s6988 + $0x129] sm:$0xff]
  %v9778 = vld [vmem:[%s6988 + $0x139] sm:$0xff]
  %v9779 = vld [vmem:[%s6988 + $0x141] sm:$0xff]
  %v9780 = vld [vmem:[%s6988 + $0x151] sm:$0xff]
  %v9781 = vld [vmem:[%s6988 + $0x159] sm:$0xff]
  %v9782 = vld [vmem:[%s6988 + $0x169] sm:$0xff]
  %v9783 = vld [vmem:[%s6988 + $0x171] sm:$0xff]
  %v9784 = vld [vmem:[%s6988 + $0x1b1] sm:$0xff]
  %v9785 = vld [vmem:[%s6988 + $0x1b9] sm:$0xff]
  %v9786 = vld [vmem:[%s6988 + $0x1c9] sm:$0xff]
  %v9787 = vld [vmem:[%s6988 + $0x1d1] sm:$0xff]
  %v9788 = vld [vmem:[%s6988 + $0x1e1] sm:$0xff]
  %v9789 = vld [vmem:[%s6988 + $0x1e9] sm:$0xff]
  %v9790 = vld [vmem:[%s6988 + $0x1f9] sm:$0xff]
  %v9791 = vld [vmem:[%s6988 + $0x201] sm:$0xff]
  %v9792 = vld [vmem:[%s6988 + $0x211] sm:$0xff]
  %v9793 = vld [vmem:[%s6988 + $0x219] sm:$0xff]
  %v9794 = vld [vmem:[%s6988 + $0x229] sm:$0xff]
  %v9795 = vld [vmem:[%s6988 + $0x231] sm:$0xff]
  %v9796 = vld [vmem:[%s6988 + $0x241] sm:$0xff]
  %v9797 = vld [vmem:[%s6988 + $0x249] sm:$0xff]
  %v9798 = vld [vmem:[%s6988 + $0x259] sm:$0xff]
  %v9799 = vld [vmem:[%s6988 + $0x261] sm:$0xff]
  %v9800 = vld [vmem:[%s6988 + $0x271] sm:$0xff]
  %v9801 = vld [vmem:[%s6988 + $0x279] sm:$0xff]
  %v9802 = vld [vmem:[%s6988 + $0x289] sm:$0xff]
  %v9803 = vld [vmem:[%s6988 + $0x291] sm:$0xff]
  %v9804 = vld [vmem:[%s6988 + $0x2a1] sm:$0xff]
  %v9805 = vld [vmem:[%s6988 + $0x2a9] sm:$0xff]
  %v9806 = vld [vmem:[%s6988 + $0x2b9] sm:$0xff]
  %v9807 = vld [vmem:[%s6988 + $0x2c1] sm:$0xff]
  %v9808 = vld [vmem:[%s6988 + $0x2d1] sm:$0xff]
  %v9809 = vld [vmem:[%s6988 + $0x2d9] sm:$0xff]
  %v9810 = vld [vmem:[%s6988 + $0x2e9] sm:$0xff]
  %v9811 = vld [vmem:[%s6988 + $0x2f1] sm:$0xff]
  %v9812 = vld [vmem:[%s6988 + $0x301] sm:$0xff]
  %v9813 = vld [vmem:[%s6988 + $0x309] sm:$0xff]
  %v9814 = vld [vmem:[%s6988 + $0x319] sm:$0xff]
  %v9815 = vld [vmem:[%s6988 + $0x321] sm:$0xff]
  %s9816 = scalar_lea.vmem %s2, 32
  %v9817 = vld [vmem:[%s9816] sm:$0xff]
  %v9819 = vsel %vm6360, %v9752, 0
  %v9822 = vsel %vm6360, %v9753, 0
  %v9825 = vsel %vm6360, %v9754, 0
  %v9828 = vsel %vm6360, %v9755, 0
  %v9831 = vsel %vm6360, %v9756, 0
  %v9834 = vsel %vm6360, %v9757, 0
  %v9837 = vsel %vm6360, %v9758, 0
  %v9840 = vsel %vm6360, %v9759, 0
  %v9843 = vsel %vm6360, %v9760, 0
  %v9846 = vsel %vm6360, %v9761, 0
  %v9849 = vsel %vm6360, %v9762, 0
  %v9852 = vsel %vm6360, %v9763, 0
  %v9855 = vsel %vm6360, %v9764, 0
  %v9858 = vsel %vm6360, %v9765, 0
  %v9861 = vsel %vm6360, %v9766, 0
  %v9864 = vsel %vm6360, %v9767, 0
  %v9867 = vsel %vm6360, %v9768, 0
  %v9870 = vsel %vm6360, %v9769, 0
  %v9873 = vsel %vm6360, %v9770, 0
  %v9876 = vsel %vm6360, %v9771, 0
  %v9879 = vsel %vm6360, %v9772, 0
  %v9882 = vsel %vm6360, %v9773, 0
  %v9885 = vsel %vm6360, %v9774, 0
  %v9888 = vsel %vm6360, %v9775, 0
  %v9891 = vsel %vm6360, %v9776, 0
  %v9894 = vsel %vm6360, %v9777, 0
  %v9897 = vsel %vm6360, %v9778, 0
  %v9900 = vsel %vm6360, %v9779, 0
  %v9903 = vsel %vm6360, %v9780, 0
  %v9906 = vsel %vm6360, %v9781, 0
  %v9909 = vsel %vm6360, %v9782, 0
  %v9912 = vsel %vm6360, %v9783, 0
  %v9915 = vsel %vm6360, %v9784, 0
  %v9918 = vsel %vm6360, %v9785, 0
  %v9921 = vsel %vm6360, %v9786, 0
  %v9924 = vsel %vm6360, %v9787, 0
  %v9927 = vsel %vm6360, %v9788, 0
  %v9930 = vsel %vm6360, %v9789, 0
  %v9933 = vsel %vm6360, %v9790, 0
  %v9936 = vsel %vm6360, %v9791, 0
  %v9939 = vsel %vm6360, %v9792, 0
  %v9942 = vsel %vm6360, %v9793, 0
  %v9945 = vsel %vm6360, %v9794, 0
  %v9948 = vsel %vm6360, %v9795, 0
  %v9951 = vsel %vm6360, %v9796, 0
  %v9954 = vsel %vm6360, %v9797, 0
  %v9957 = vsel %vm6360, %v9798, 0
  %v9960 = vsel %vm6360, %v9799, 0
  %v9963 = vsel %vm6360, %v9800, 0
  %v9966 = vsel %vm6360, %v9801, 0
  %v9969 = vsel %vm6360, %v9802, 0
  %v9972 = vsel %vm6360, %v9803, 0
  %v9975 = vsel %vm6360, %v9804, 0
  %v9978 = vsel %vm6360, %v9805, 0
  %v9981 = vsel %vm6360, %v9806, 0
  %v9984 = vsel %vm6360, %v9807, 0
  %v9987 = vsel %vm6360, %v9808, 0
  %v9990 = vsel %vm6360, %v9809, 0
  %v9993 = vsel %vm6360, %v9810, 0
  %v9996 = vsel %vm6360, %v9811, 0
  %v9999 = vsel %vm6360, %v9812, 0
  %v10002 = vsel %vm6360, %v9813, 0
  %v10005 = vsel %vm6360, %v9814, 0
  %v10008 = vsel %vm6360, %v9815, 0
  %10010 = vmatprep.subr.mxu0 0.0
  %10011 = vmatpush1.msra.mxu0 0.0
  %10012 = vmatprep.subr.mxu0 0.0
  %10013 = vmatpush1.msra.mxu0 0.0
  %10014 = vmatprep.subr.mxu0 0.0
  %10015 = vmatpush1.msra.mxu0 0.0
  %10016 = vmatprep.subr.mxu0 0.0
  %10017 = vmatpush1.msra.mxu0 0.0
  %10018 = vmatprep.subr.mxu0 0.0
  %10019 = vmatpush1.msra.mxu0 0.0
  %10020 = vmatprep.subr.mxu0 0.0
  %10021 = vmatpush1.msra.mxu0 0.0
  %10022 = vmatprep.subr.mxu0 0.0
  %10023 = vmatpush1.msra.mxu0 0.0
  %10024 = vmatprep.subr.mxu0 0.0
  %10025 = vmatpush1.msra.mxu0 0.0
  %10026 = vmatprep.subr.mxu0 0.0
  %10027 = vmatpush1.msra.mxu0 0.0
  %10028 = vmatprep.subr.mxu0 0.0
  %10029 = vmatpush1.msra.mxu0 0.0
  %10030 = vmatprep.subr.mxu0 0.0
  %10031 = vmatpush1.msra.mxu0 0.0
  %10032 = vmatprep.subr.mxu0 0.0
  %10033 = vmatpush1.msra.mxu0 0.0
  %10034 = vmatprep.subr.mxu0 0.0
  %10035 = vmatpush1.msra.mxu0 0.0
  %10036 = vmatprep.subr.mxu0 0.0
  %10037 = vmatpush1.msra.mxu0 0.0
  %10038 = vmatprep.subr.mxu0 0.0
  %10039 = vmatpush1.msra.mxu0 0.0
  %10040 = vmatprep.subr.mxu0 0.0
  %10041 = vmatpush1.msra.mxu0 %v9817
  %10042 = vmatprep.subr.mxu0 0.0
  %10043 = vmatpush2.msra.mxu0 0.0
  %10044 = vmatprep.subr.mxu0 0.0
  %10045 = vmatpush2.msra.mxu0 0.0
  %10046 = vmatprep.subr.mxu0 0.0
  %10047 = vmatpush2.msra.mxu0 0.0
  %10048 = vmatprep.subr.mxu0 0.0
  %10049 = vmatpush2.msra.mxu0 0.0
  %10050 = vmatprep.subr.mxu0 0.0
  %10051 = vmatpush2.msra.mxu0 0.0
  %10052 = vmatprep.subr.mxu0 0.0
  %10053 = vmatpush2.msra.mxu0 0.0
  %10054 = vmatprep.subr.mxu0 0.0
  %10055 = vmatpush2.msra.mxu0 0.0
  %10056 = vmatprep.subr.mxu0 0.0
  %10057 = vmatpush2.msra.mxu0 0.0
  %10058 = vmatprep.subr.mxu0 0.0
  %10059 = vmatpush2.msra.mxu0 0.0
  %10060 = vmatprep.subr.mxu0 0.0
  %10061 = vmatpush2.msra.mxu0 0.0
  %10062 = vmatprep.subr.mxu0 0.0
  %10063 = vmatpush2.msra.mxu0 0.0
  %10064 = vmatprep.subr.mxu0 0.0
  %10065 = vmatpush2.msra.mxu0 0.0
  %10066 = vmatprep.subr.mxu0 0.0
  %10067 = vmatpush2.msra.mxu0 0.0
  %10068 = vmatprep.subr.mxu0 0.0
  %10069 = vmatpush2.msra.mxu0 0.0
  %10070 = vmatprep.subr.mxu0 0.0
  %10071 = vmatpush2.msra.mxu0 0.0
  %10072 = vmatprep.subr.mxu0 0.0
  %10073 = vmatpush2.msra.mxu0 0.0
  %10074 = vmatprep.mubr.f32.mxu0 0.0
  %10075 = vmatmul.mubr.f32.gmra.mxu0 %v9819
  %v10076 = vpop.f32.mrf.mxu0
  %v10077 = vadd.f32 0.0, %v10076
  %v10078 = vpop.f32.mrf.mxu0
  %10079 = vmatprep.mubr.f32.mxu0 0.0
  %10080 = vmatmul.mubr.f32.gmra.mxu0 %v9822
  %v10081 = vpop.f32.mrf.mxu0
  %v10082 = vadd.f32 0.0, %v10081
  %v10083 = vpop.f32.mrf.mxu0
  %10084 = vmatprep.mubr.f32.mxu0 0.0
  %10085 = vmatmul.mubr.f32.gmra.mxu0 %v9825
  %v10086 = vpop.f32.mrf.mxu0
  %v10087 = vadd.f32 0.0, %v10086
  %v10088 = vpop.f32.mrf.mxu0
  %10089 = vmatprep.mubr.f32.mxu0 0.0
  %10090 = vmatmul.mubr.f32.gmra.mxu0 %v9828
  %v10091 = vpop.f32.mrf.mxu0
  %v10092 = vadd.f32 0.0, %v10091
  %v10093 = vpop.f32.mrf.mxu0
  %10094 = vmatprep.mubr.f32.mxu0 0.0
  %10095 = vmatmul.mubr.f32.gmra.mxu0 %v9831
  %v10096 = vpop.f32.mrf.mxu0
  %v10097 = vadd.f32 0.0, %v10096
  %v10098 = vpop.f32.mrf.mxu0
  %10099 = vmatprep.mubr.f32.mxu0 0.0
  %10100 = vmatmul.mubr.f32.gmra.mxu0 %v9834
  %v10101 = vpop.f32.mrf.mxu0
  %v10102 = vadd.f32 0.0, %v10101
  %v10103 = vpop.f32.mrf.mxu0
  %10104 = vmatprep.mubr.f32.mxu0 0.0
  %10105 = vmatmul.mubr.f32.gmra.mxu0 %v9837
  %v10106 = vpop.f32.mrf.mxu0
  %v10107 = vadd.f32 0.0, %v10106
  %v10108 = vpop.f32.mrf.mxu0
  %10109 = vmatprep.mubr.f32.mxu0 0.0
  %10110 = vmatmul.mubr.f32.gmra.mxu0 %v9840
  %v10111 = vpop.f32.mrf.mxu0
  %v10112 = vadd.f32 0.0, %v10111
  %v10113 = vpop.f32.mrf.mxu0
  %10114 = vmatprep.mubr.f32.mxu0 0.0
  %10115 = vmatmul.mubr.f32.gmra.mxu0 %v9843
  %v10116 = vpop.f32.mrf.mxu0
  %v10117 = vadd.f32 0.0, %v10116
  %v10118 = vpop.f32.mrf.mxu0
  %10119 = vmatprep.mubr.f32.mxu0 0.0
  %10120 = vmatmul.mubr.f32.gmra.mxu0 %v9846
  %v10121 = vpop.f32.mrf.mxu0
  %v10122 = vadd.f32 0.0, %v10121
  %v10123 = vpop.f32.mrf.mxu0
  %10124 = vmatprep.mubr.f32.mxu0 0.0
  %10125 = vmatmul.mubr.f32.gmra.mxu0 %v9849
  %v10126 = vpop.f32.mrf.mxu0
  %v10127 = vadd.f32 0.0, %v10126
  %v10128 = vpop.f32.mrf.mxu0
  %10129 = vmatprep.mubr.f32.mxu0 0.0
  %10130 = vmatmul.mubr.f32.gmra.mxu0 %v9852
  %v10131 = vpop.f32.mrf.mxu0
  %v10132 = vadd.f32 0.0, %v10131
  %v10133 = vpop.f32.mrf.mxu0
  %10134 = vmatprep.mubr.f32.mxu0 0.0
  %10135 = vmatmul.mubr.f32.gmra.mxu0 %v9855
  %v10136 = vpop.f32.mrf.mxu0
  %v10137 = vadd.f32 0.0, %v10136
  %v10138 = vpop.f32.mrf.mxu0
  %10139 = vmatprep.mubr.f32.mxu0 0.0
  %10140 = vmatmul.mubr.f32.gmra.mxu0 %v9858
  %v10141 = vpop.f32.mrf.mxu0
  %v10142 = vadd.f32 0.0, %v10141
  %v10143 = vpop.f32.mrf.mxu0
  %10144 = vmatprep.mubr.f32.mxu0 0.0
  %10145 = vmatmul.mubr.f32.gmra.mxu0 %v9861
  %v10146 = vpop.f32.mrf.mxu0
  %v10147 = vadd.f32 0.0, %v10146
  %v10148 = vpop.f32.mrf.mxu0
  %10149 = vmatprep.mubr.f32.mxu0 0.0
  %10150 = vmatmul.mubr.f32.gmra.mxu0 %v9864
  %v10151 = vpop.f32.mrf.mxu0
  %v10152 = vadd.f32 0.0, %v10151
  %v10153 = vpop.f32.mrf.mxu0
  %10154 = vmatprep.mubr.f32.mxu0 0.0
  %10155 = vmatmul.mubr.f32.gmra.mxu0 %v9867
  %v10156 = vpop.f32.mrf.mxu0
  %v10157 = vadd.f32 0.0, %v10156
  %v10158 = vpop.f32.mrf.mxu0
  %10159 = vmatprep.mubr.f32.mxu0 0.0
  %10160 = vmatmul.mubr.f32.gmra.mxu0 %v9870
  %v10161 = vpop.f32.mrf.mxu0
  %v10162 = vadd.f32 0.0, %v10161
  %v10163 = vpop.f32.mrf.mxu0
  %10164 = vmatprep.mubr.f32.mxu0 0.0
  %10165 = vmatmul.mubr.f32.gmra.mxu0 %v9873
  %v10166 = vpop.f32.mrf.mxu0
  %v10167 = vadd.f32 0.0, %v10166
  %v10168 = vpop.f32.mrf.mxu0
  %10169 = vmatprep.mubr.f32.mxu0 0.0
  %10170 = vmatmul.mubr.f32.gmra.mxu0 %v9876
  %v10171 = vpop.f32.mrf.mxu0
  %v10172 = vadd.f32 0.0, %v10171
  %v10173 = vpop.f32.mrf.mxu0
  %10174 = vmatprep.mubr.f32.mxu0 0.0
  %10175 = vmatmul.mubr.f32.gmra.mxu0 %v9879
  %v10176 = vpop.f32.mrf.mxu0
  %v10177 = vadd.f32 0.0, %v10176
  %v10178 = vpop.f32.mrf.mxu0
  %10179 = vmatprep.mubr.f32.mxu0 0.0
  %10180 = vmatmul.mubr.f32.gmra.mxu0 %v9882
  %v10181 = vpop.f32.mrf.mxu0
  %v10182 = vadd.f32 0.0, %v10181
  %v10183 = vpop.f32.mrf.mxu0
  %10184 = vmatprep.mubr.f32.mxu0 0.0
  %10185 = vmatmul.mubr.f32.gmra.mxu0 %v9885
  %v10186 = vpop.f32.mrf.mxu0
  %v10187 = vadd.f32 0.0, %v10186
  %v10188 = vpop.f32.mrf.mxu0
  %10189 = vmatprep.mubr.f32.mxu0 0.0
  %10190 = vmatmul.mubr.f32.gmra.mxu0 %v9888
  %v10191 = vpop.f32.mrf.mxu0
  %v10192 = vadd.f32 0.0, %v10191
  %v10193 = vpop.f32.mrf.mxu0
  %10194 = vmatprep.mubr.f32.mxu0 0.0
  %10195 = vmatmul.mubr.f32.gmra.mxu0 %v9891
  %v10196 = vpop.f32.mrf.mxu0
  %v10197 = vadd.f32 0.0, %v10196
  %v10198 = vpop.f32.mrf.mxu0
  %10199 = vmatprep.mubr.f32.mxu0 0.0
  %10200 = vmatmul.mubr.f32.gmra.mxu0 %v9894
  %v10201 = vpop.f32.mrf.mxu0
  %v10202 = vadd.f32 0.0, %v10201
  %v10203 = vpop.f32.mrf.mxu0
  %10204 = vmatprep.mubr.f32.mxu0 0.0
  %10205 = vmatmul.mubr.f32.gmra.mxu0 %v9897
  %v10206 = vpop.f32.mrf.mxu0
  %v10207 = vadd.f32 0.0, %v10206
  %v10208 = vpop.f32.mrf.mxu0
  %10209 = vmatprep.mubr.f32.mxu0 0.0
  %10210 = vmatmul.mubr.f32.gmra.mxu0 %v9900
  %v10211 = vpop.f32.mrf.mxu0
  %v10212 = vadd.f32 0.0, %v10211
  %v10213 = vpop.f32.mrf.mxu0
  %10214 = vmatprep.mubr.f32.mxu0 0.0
  %10215 = vmatmul.mubr.f32.gmra.mxu0 %v9903
  %v10216 = vpop.f32.mrf.mxu0
  %v10217 = vadd.f32 0.0, %v10216
  %v10218 = vpop.f32.mrf.mxu0
  %10219 = vmatprep.mubr.f32.mxu0 0.0
  %10220 = vmatmul.mubr.f32.gmra.mxu0 %v9906
  %v10221 = vpop.f32.mrf.mxu0
  %v10222 = vadd.f32 0.0, %v10221
  %v10223 = vpop.f32.mrf.mxu0
  %10224 = vmatprep.mubr.f32.mxu0 0.0
  %10225 = vmatmul.mubr.f32.gmra.mxu0 %v9909
  %v10226 = vpop.f32.mrf.mxu0
  %v10227 = vadd.f32 0.0, %v10226
  %v10228 = vpop.f32.mrf.mxu0
  %10229 = vmatprep.mubr.f32.mxu0 0.0
  %10230 = vmatmul.mubr.f32.gmra.mxu0 %v9912
  %v10231 = vpop.f32.mrf.mxu0
  %v10232 = vadd.f32 0.0, %v10231
  %v10233 = vpop.f32.mrf.mxu0
  %10234 = vmatprep.mubr.f32.mxu0 0.0
  %10235 = vmatmul.mubr.f32.gmra.mxu0 %v9915
  %v10236 = vpop.f32.mrf.mxu0
  %v10237 = vadd.f32 0.0, %v10236
  %v10238 = vpop.f32.mrf.mxu0
  %10239 = vmatprep.mubr.f32.mxu0 0.0
  %10240 = vmatmul.mubr.f32.gmra.mxu0 %v9918
  %v10241 = vpop.f32.mrf.mxu0
  %v10242 = vadd.f32 0.0, %v10241
  %v10243 = vpop.f32.mrf.mxu0
  %10244 = vmatprep.mubr.f32.mxu0 0.0
  %10245 = vmatmul.mubr.f32.gmra.mxu0 %v9921
  %v10246 = vpop.f32.mrf.mxu0
  %v10247 = vadd.f32 0.0, %v10246
  %v10248 = vpop.f32.mrf.mxu0
  %10249 = vmatprep.mubr.f32.mxu0 0.0
  %10250 = vmatmul.mubr.f32.gmra.mxu0 %v9924
  %v10251 = vpop.f32.mrf.mxu0
  %v10252 = vadd.f32 0.0, %v10251
  %v10253 = vpop.f32.mrf.mxu0
  %10254 = vmatprep.mubr.f32.mxu0 0.0
  %10255 = vmatmul.mubr.f32.gmra.mxu0 %v9927
  %v10256 = vpop.f32.mrf.mxu0
  %v10257 = vadd.f32 0.0, %v10256
  %v10258 = vpop.f32.mrf.mxu0
  %10259 = vmatprep.mubr.f32.mxu0 0.0
  %10260 = vmatmul.mubr.f32.gmra.mxu0 %v9930
  %v10261 = vpop.f32.mrf.mxu0
  %v10262 = vadd.f32 0.0, %v10261
  %v10263 = vpop.f32.mrf.mxu0
  %10264 = vmatprep.mubr.f32.mxu0 0.0
  %10265 = vmatmul.mubr.f32.gmra.mxu0 %v9933
  %v10266 = vpop.f32.mrf.mxu0
  %v10267 = vadd.f32 0.0, %v10266
  %v10268 = vpop.f32.mrf.mxu0
  %10269 = vmatprep.mubr.f32.mxu0 0.0
  %10270 = vmatmul.mubr.f32.gmra.mxu0 %v9936
  %v10271 = vpop.f32.mrf.mxu0
  %v10272 = vadd.f32 0.0, %v10271
  %v10273 = vpop.f32.mrf.mxu0
  %10274 = vmatprep.mubr.f32.mxu0 0.0
  %10275 = vmatmul.mubr.f32.gmra.mxu0 %v9939
  %v10276 = vpop.f32.mrf.mxu0
  %v10277 = vadd.f32 0.0, %v10276
  %v10278 = vpop.f32.mrf.mxu0
  %10279 = vmatprep.mubr.f32.mxu0 0.0
  %10280 = vmatmul.mubr.f32.gmra.mxu0 %v9942
  %v10281 = vpop.f32.mrf.mxu0
  %v10282 = vadd.f32 0.0, %v10281
  %v10283 = vpop.f32.mrf.mxu0
  %10284 = vmatprep.mubr.f32.mxu0 0.0
  %10285 = vmatmul.mubr.f32.gmra.mxu0 %v9945
  %v10286 = vpop.f32.mrf.mxu0
  %v10287 = vadd.f32 0.0, %v10286
  %v10288 = vpop.f32.mrf.mxu0
  %10289 = vmatprep.mubr.f32.mxu0 0.0
  %10290 = vmatmul.mubr.f32.gmra.mxu0 %v9948
  %v10291 = vpop.f32.mrf.mxu0
  %v10292 = vadd.f32 0.0, %v10291
  %v10293 = vpop.f32.mrf.mxu0
  %10294 = vmatprep.mubr.f32.mxu0 0.0
  %10295 = vmatmul.mubr.f32.gmra.mxu0 %v9951
  %v10296 = vpop.f32.mrf.mxu0
  %v10297 = vadd.f32 0.0, %v10296
  %v10298 = vpop.f32.mrf.mxu0
  %10299 = vmatprep.mubr.f32.mxu0 0.0
  %10300 = vmatmul.mubr.f32.gmra.mxu0 %v9954
  %v10301 = vpop.f32.mrf.mxu0
  %v10302 = vadd.f32 0.0, %v10301
  %v10303 = vpop.f32.mrf.mxu0
  %10304 = vmatprep.mubr.f32.mxu0 0.0
  %10305 = vmatmul.mubr.f32.gmra.mxu0 %v9957
  %v10306 = vpop.f32.mrf.mxu0
  %v10307 = vadd.f32 0.0, %v10306
  %v10308 = vpop.f32.mrf.mxu0
  %10309 = vmatprep.mubr.f32.mxu0 0.0
  %10310 = vmatmul.mubr.f32.gmra.mxu0 %v9960
  %v10311 = vpop.f32.mrf.mxu0
  %v10312 = vadd.f32 0.0, %v10311
  %v10313 = vpop.f32.mrf.mxu0
  %10314 = vmatprep.mubr.f32.mxu0 0.0
  %10315 = vmatmul.mubr.f32.gmra.mxu0 %v9963
  %v10316 = vpop.f32.mrf.mxu0
  %v10317 = vadd.f32 0.0, %v10316
  %v10318 = vpop.f32.mrf.mxu0
  %10319 = vmatprep.mubr.f32.mxu0 0.0
  %10320 = vmatmul.mubr.f32.gmra.mxu0 %v9966
  %v10321 = vpop.f32.mrf.mxu0
  %v10322 = vadd.f32 0.0, %v10321
  %v10323 = vpop.f32.mrf.mxu0
  %10324 = vmatprep.mubr.f32.mxu0 0.0
  %10325 = vmatmul.mubr.f32.gmra.mxu0 %v9969
  %v10326 = vpop.f32.mrf.mxu0
  %v10327 = vadd.f32 0.0, %v10326
  %v10328 = vpop.f32.mrf.mxu0
  %10329 = vmatprep.mubr.f32.mxu0 0.0
  %10330 = vmatmul.mubr.f32.gmra.mxu0 %v9972
  %v10331 = vpop.f32.mrf.mxu0
  %v10332 = vadd.f32 0.0, %v10331
  %v10333 = vpop.f32.mrf.mxu0
  %10334 = vmatprep.mubr.f32.mxu0 0.0
  %10335 = vmatmul.mubr.f32.gmra.mxu0 %v9975
  %v10336 = vpop.f32.mrf.mxu0
  %v10337 = vadd.f32 0.0, %v10336
  %v10338 = vpop.f32.mrf.mxu0
  %10339 = vmatprep.mubr.f32.mxu0 0.0
  %10340 = vmatmul.mubr.f32.gmra.mxu0 %v9978
  %v10341 = vpop.f32.mrf.mxu0
  %v10342 = vadd.f32 0.0, %v10341
  %v10343 = vpop.f32.mrf.mxu0
  %10344 = vmatprep.mubr.f32.mxu0 0.0
  %10345 = vmatmul.mubr.f32.gmra.mxu0 %v9981
  %v10346 = vpop.f32.mrf.mxu0
  %v10347 = vadd.f32 0.0, %v10346
  %v10348 = vpop.f32.mrf.mxu0
  %10349 = vmatprep.mubr.f32.mxu0 0.0
  %10350 = vmatmul.mubr.f32.gmra.mxu0 %v9984
  %v10351 = vpop.f32.mrf.mxu0
  %v10352 = vadd.f32 0.0, %v10351
  %v10353 = vpop.f32.mrf.mxu0
  %10354 = vmatprep.mubr.f32.mxu0 0.0
  %10355 = vmatmul.mubr.f32.gmra.mxu0 %v9987
  %v10356 = vpop.f32.mrf.mxu0
  %v10357 = vadd.f32 0.0, %v10356
  %v10358 = vpop.f32.mrf.mxu0
  %10359 = vmatprep.mubr.f32.mxu0 0.0
  %10360 = vmatmul.mubr.f32.gmra.mxu0 %v9990
  %v10361 = vpop.f32.mrf.mxu0
  %v10362 = vadd.f32 0.0, %v10361
  %v10363 = vpop.f32.mrf.mxu0
  %10364 = vmatprep.mubr.f32.mxu0 0.0
  %10365 = vmatmul.mubr.f32.gmra.mxu0 %v9993
  %v10366 = vpop.f32.mrf.mxu0
  %v10367 = vadd.f32 0.0, %v10366
  %v10368 = vpop.f32.mrf.mxu0
  %10369 = vmatprep.mubr.f32.mxu0 0.0
  %10370 = vmatmul.mubr.f32.gmra.mxu0 %v9996
  %v10371 = vpop.f32.mrf.mxu0
  %v10372 = vadd.f32 0.0, %v10371
  %v10373 = vpop.f32.mrf.mxu0
  %10374 = vmatprep.mubr.f32.mxu0 0.0
  %10375 = vmatmul.mubr.f32.gmra.mxu0 %v9999
  %v10376 = vpop.f32.mrf.mxu0
  %v10377 = vadd.f32 0.0, %v10376
  %v10378 = vpop.f32.mrf.mxu0
  %10379 = vmatprep.mubr.f32.mxu0 0.0
  %10380 = vmatmul.mubr.f32.gmra.mxu0 %v10002
  %v10381 = vpop.f32.mrf.mxu0
  %v10382 = vadd.f32 0.0, %v10381
  %v10383 = vpop.f32.mrf.mxu0
  %10384 = vmatprep.mubr.f32.mxu0 0.0
  %10385 = vmatmul.mubr.f32.gmra.mxu0 %v10005
  %v10386 = vpop.f32.mrf.mxu0
  %v10387 = vadd.f32 0.0, %v10386
  %v10388 = vpop.f32.mrf.mxu0
  %10389 = vmatprep.mubr.f32.mxu0 0.0
  %10390 = vmatmul.mubr.f32.gmra.mxu0 %v10008
  %v10391 = vpop.f32.mrf.mxu0
  %v10392 = vadd.f32 0.0, %v10391
  %v10393 = vpop.f32.mrf.mxu0
  %10394 = vdwg.mxu0
  %v10395 = vadd.f32 %v9688, %v10077
  %v10396 = vadd.f32 %v9689, %v10082
  %v10397 = vadd.f32 %v9690, %v10087
  %v10398 = vadd.f32 %v9691, %v10092
  %v10399 = vadd.f32 %v9692, %v10097
  %v10400 = vadd.f32 %v9693, %v10102
  %v10401 = vadd.f32 %v9694, %v10107
  %v10402 = vadd.f32 %v9695, %v10112
  %v10403 = vadd.f32 %v9696, %v10117
  %v10404 = vadd.f32 %v9697, %v10122
  %v10405 = vadd.f32 %v9698, %v10127
  %v10406 = vadd.f32 %v9699, %v10132
  %v10407 = vadd.f32 %v9700, %v10137
  %v10408 = vadd.f32 %v9701, %v10142
  %v10409 = vadd.f32 %v9702, %v10147
  %v10410 = vadd.f32 %v9703, %v10152
  %v10411 = vadd.f32 %v9704, %v10157
  %v10412 = vadd.f32 %v9705, %v10162
  %v10413 = vadd.f32 %v9706, %v10167
  %v10414 = vadd.f32 %v9707, %v10172
  %v10415 = vadd.f32 %v9708, %v10177
  %v10416 = vadd.f32 %v9709, %v10182
  %v10417 = vadd.f32 %v9710, %v10187
  %v10418 = vadd.f32 %v9711, %v10192
  %v10419 = vadd.f32 %v9712, %v10197
  %v10420 = vadd.f32 %v9713, %v10202
  %v10421 = vadd.f32 %v9714, %v10207
  %v10422 = vadd.f32 %v9715, %v10212
  %v10423 = vadd.f32 %v9716, %v10217
  %v10424 = vadd.f32 %v9717, %v10222
  %v10425 = vadd.f32 %v9718, %v10227
  %v10426 = vadd.f32 %v9719, %v10232
  %v10427 = vadd.f32 %v9720, %v10237
  %v10428 = vadd.f32 %v9721, %v10242
  %v10429 = vadd.f32 %v9722, %v10247
  %v10430 = vadd.f32 %v9723, %v10252
  %v10431 = vadd.f32 %v9724, %v10257
  %v10432 = vadd.f32 %v9725, %v10262
  %v10433 = vadd.f32 %v9726, %v10267
  %v10434 = vadd.f32 %v9727, %v10272
  %v10435 = vadd.f32 %v9728, %v10277
  %v10436 = vadd.f32 %v9729, %v10282
  %v10437 = vadd.f32 %v9730, %v10287
  %v10438 = vadd.f32 %v9731, %v10292
  %v10439 = vadd.f32 %v9732, %v10297
  %v10440 = vadd.f32 %v9733, %v10302
  %v10441 = vadd.f32 %v9734, %v10307
  %v10442 = vadd.f32 %v9735, %v10312
  %v10443 = vadd.f32 %v9736, %v10317
  %v10444 = vadd.f32 %v9737, %v10322
  %v10445 = vadd.f32 %v9738, %v10327
  %v10446 = vadd.f32 %v9739, %v10332
  %v10447 = vadd.f32 %v9740, %v10337
  %v10448 = vadd.f32 %v9741, %v10342
  %v10449 = vadd.f32 %v9742, %v10347
  %v10450 = vadd.f32 %v9743, %v10352
  %v10451 = vadd.f32 %v9744, %v10357
  %v10452 = vadd.f32 %v9745, %v10362
  %v10453 = vadd.f32 %v9746, %v10367
  %v10454 = vadd.f32 %v9747, %v10372
  %v10455 = vadd.f32 %v9748, %v10377
  %v10456 = vadd.f32 %v9749, %v10382
  %v10457 = vadd.f32 %v9750, %v10387
  %v10458 = vadd.f32 %v9751, %v10392
  %v10459 = vld [vmem:[%s6988 + $0x2] sm:$0xff]
  %v10460 = vld [vmem:[%s6988 + $0xa] sm:$0xff]
  %v10461 = vld [vmem:[%s6988 + $0x1a] sm:$0xff]
  %v10462 = vld [vmem:[%s6988 + $0x22] sm:$0xff]
  %v10463 = vld [vmem:[%s6988 + $0x32] sm:$0xff]
  %v10464 = vld [vmem:[%s6988 + $0x3a] sm:$0xff]
  %v10465 = vld [vmem:[%s6988 + $0x4a] sm:$0xff]
  %v10466 = vld [vmem:[%s6988 + $0x52] sm:$0xff]
  %v10467 = vld [vmem:[%s6988 + $0x62] sm:$0xff]
  %v10468 = vld [vmem:[%s6988 + $0x6a] sm:$0xff]
  %v10469 = vld [vmem:[%s6988 + $0x7a] sm:$0xff]
  %v10470 = vld [vmem:[%s6988 + $0x82] sm:$0xff]
  %v10471 = vld [vmem:[%s6988 + $0x92] sm:$0xff]
  %v10472 = vld [vmem:[%s6988 + $0x9a] sm:$0xff]
  %v10473 = vld [vmem:[%s6988 + $0xaa] sm:$0xff]
  %v10474 = vld [vmem:[%s6988 + $0xb2] sm:$0xff]
  %v10475 = vld [vmem:[%s6988 + $0xc2] sm:$0xff]
  %v10476 = vld [vmem:[%s6988 + $0xca] sm:$0xff]
  %v10477 = vld [vmem:[%s6988 + $0xda] sm:$0xff]
  %v10478 = vld [vmem:[%s6988 + $0xe2] sm:$0xff]
  %v10479 = vld [vmem:[%s6988 + $0xf2] sm:$0xff]
  %v10480 = vld [vmem:[%s6988 + $0xfa] sm:$0xff]
  %v10481 = vld [vmem:[%s6988 + $0x10a] sm:$0xff]
  %v10482 = vld [vmem:[%s6988 + $0x112] sm:$0xff]
  %v10483 = vld [vmem:[%s6988 + $0x122] sm:$0xff]
  %v10484 = vld [vmem:[%s6988 + $0x12a] sm:$0xff]
  %v10485 = vld [vmem:[%s6988 + $0x13a] sm:$0xff]
  %v10486 = vld [vmem:[%s6988 + $0x142] sm:$0xff]
  %v10487 = vld [vmem:[%s6988 + $0x152] sm:$0xff]
  %v10488 = vld [vmem:[%s6988 + $0x15a] sm:$0xff]
  %v10489 = vld [vmem:[%s6988 + $0x16a] sm:$0xff]
  %v10490 = vld [vmem:[%s6988 + $0x172] sm:$0xff]
  %v10491 = vld [vmem:[%s6988 + $0x1b2] sm:$0xff]
  %v10492 = vld [vmem:[%s6988 + $0x1ba] sm:$0xff]
  %v10493 = vld [vmem:[%s6988 + $0x1ca] sm:$0xff]
  %v10494 = vld [vmem:[%s6988 + $0x1d2] sm:$0xff]
  %v10495 = vld [vmem:[%s6988 + $0x1e2] sm:$0xff]
  %v10496 = vld [vmem:[%s6988 + $0x1ea] sm:$0xff]
  %v10497 = vld [vmem:[%s6988 + $0x1fa] sm:$0xff]
  %v10498 = vld [vmem:[%s6988 + $0x202] sm:$0xff]
  %v10499 = vld [vmem:[%s6988 + $0x212] sm:$0xff]
  %v10500 = vld [vmem:[%s6988 + $0x21a] sm:$0xff]
  %v10501 = vld [vmem:[%s6988 + $0x22a] sm:$0xff]
  %v10502 = vld [vmem:[%s6988 + $0x232] sm:$0xff]
  %v10503 = vld [vmem:[%s6988 + $0x242] sm:$0xff]
  %v10504 = vld [vmem:[%s6988 + $0x24a] sm:$0xff]
  %v10505 = vld [vmem:[%s6988 + $0x25a] sm:$0xff]
  %v10506 = vld [vmem:[%s6988 + $0x262] sm:$0xff]
  %v10507 = vld [vmem:[%s6988 + $0x272] sm:$0xff]
  %v10508 = vld [vmem:[%s6988 + $0x27a] sm:$0xff]
  %v10509 = vld [vmem:[%s6988 + $0x28a] sm:$0xff]
  %v10510 = vld [vmem:[%s6988 + $0x292] sm:$0xff]
  %v10511 = vld [vmem:[%s6988 + $0x2a2] sm:$0xff]
  %v10512 = vld [vmem:[%s6988 + $0x2aa] sm:$0xff]
  %v10513 = vld [vmem:[%s6988 + $0x2ba] sm:$0xff]
  %v10514 = vld [vmem:[%s6988 + $0x2c2] sm:$0xff]
  %v10515 = vld [vmem:[%s6988 + $0x2d2] sm:$0xff]
  %v10516 = vld [vmem:[%s6988 + $0x2da] sm:$0xff]
  %v10517 = vld [vmem:[%s6988 + $0x2ea] sm:$0xff]
  %v10518 = vld [vmem:[%s6988 + $0x2f2] sm:$0xff]
  %v10519 = vld [vmem:[%s6988 + $0x302] sm:$0xff]
  %v10520 = vld [vmem:[%s6988 + $0x30a] sm:$0xff]
  %v10521 = vld [vmem:[%s6988 + $0x31a] sm:$0xff]
  %v10522 = vld [vmem:[%s6988 + $0x322] sm:$0xff]
  %s10523 = scalar_lea.vmem %s2, 40
  %v10524 = vld [vmem:[%s10523] sm:$0xff]
  %v10526 = vsel %vm6360, %v10459, 0
  %v10529 = vsel %vm6360, %v10460, 0
  %v10532 = vsel %vm6360, %v10461, 0
  %v10535 = vsel %vm6360, %v10462, 0
  %v10538 = vsel %vm6360, %v10463, 0
  %v10541 = vsel %vm6360, %v10464, 0
  %v10544 = vsel %vm6360, %v10465, 0
  %v10547 = vsel %vm6360, %v10466, 0
  %v10550 = vsel %vm6360, %v10467, 0
  %v10553 = vsel %vm6360, %v10468, 0
  %v10556 = vsel %vm6360, %v10469, 0
  %v10559 = vsel %vm6360, %v10470, 0
  %v10562 = vsel %vm6360, %v10471, 0
  %v10565 = vsel %vm6360, %v10472, 0
  %v10568 = vsel %vm6360, %v10473, 0
  %v10571 = vsel %vm6360, %v10474, 0
  %v10574 = vsel %vm6360, %v10475, 0
  %v10577 = vsel %vm6360, %v10476, 0
  %v10580 = vsel %vm6360, %v10477, 0
  %v10583 = vsel %vm6360, %v10478, 0
  %v10586 = vsel %vm6360, %v10479, 0
  %v10589 = vsel %vm6360, %v10480, 0
  %v10592 = vsel %vm6360, %v10481, 0
  %v10595 = vsel %vm6360, %v10482, 0
  %v10598 = vsel %vm6360, %v10483, 0
  %v10601 = vsel %vm6360, %v10484, 0
  %v10604 = vsel %vm6360, %v10485, 0
  %v10607 = vsel %vm6360, %v10486, 0
  %v10610 = vsel %vm6360, %v10487, 0
  %v10613 = vsel %vm6360, %v10488, 0
  %v10616 = vsel %vm6360, %v10489, 0
  %v10619 = vsel %vm6360, %v10490, 0
  %v10622 = vsel %vm6360, %v10491, 0
  %v10625 = vsel %vm6360, %v10492, 0
  %v10628 = vsel %vm6360, %v10493, 0
  %v10631 = vsel %vm6360, %v10494, 0
  %v10634 = vsel %vm6360, %v10495, 0
  %v10637 = vsel %vm6360, %v10496, 0
  %v10640 = vsel %vm6360, %v10497, 0
  %v10643 = vsel %vm6360, %v10498, 0
  %v10646 = vsel %vm6360, %v10499, 0
  %v10649 = vsel %vm6360, %v10500, 0
  %v10652 = vsel %vm6360, %v10501, 0
  %v10655 = vsel %vm6360, %v10502, 0
  %v10658 = vsel %vm6360, %v10503, 0
  %v10661 = vsel %vm6360, %v10504, 0
  %v10664 = vsel %vm6360, %v10505, 0
  %v10667 = vsel %vm6360, %v10506, 0
  %v10670 = vsel %vm6360, %v10507, 0
  %v10673 = vsel %vm6360, %v10508, 0
  %v10676 = vsel %vm6360, %v10509, 0
  %v10679 = vsel %vm6360, %v10510, 0
  %v10682 = vsel %vm6360, %v10511, 0
  %v10685 = vsel %vm6360, %v10512, 0
  %v10688 = vsel %vm6360, %v10513, 0
  %v10691 = vsel %vm6360, %v10514, 0
  %v10694 = vsel %vm6360, %v10515, 0
  %v10697 = vsel %vm6360, %v10516, 0
  %v10700 = vsel %vm6360, %v10517, 0
  %v10703 = vsel %vm6360, %v10518, 0
  %v10706 = vsel %vm6360, %v10519, 0
  %v10709 = vsel %vm6360, %v10520, 0
  %v10712 = vsel %vm6360, %v10521, 0
  %v10715 = vsel %vm6360, %v10522, 0
  %10717 = vmatprep.subr.mxu0 0.0
  %10718 = vmatpush1.msra.mxu0 0.0
  %10719 = vmatprep.subr.mxu0 0.0
  %10720 = vmatpush1.msra.mxu0 0.0
  %10721 = vmatprep.subr.mxu0 0.0
  %10722 = vmatpush1.msra.mxu0 0.0
  %10723 = vmatprep.subr.mxu0 0.0
  %10724 = vmatpush1.msra.mxu0 0.0
  %10725 = vmatprep.subr.mxu0 0.0
  %10726 = vmatpush1.msra.mxu0 0.0
  %10727 = vmatprep.subr.mxu0 0.0
  %10728 = vmatpush1.msra.mxu0 0.0
  %10729 = vmatprep.subr.mxu0 0.0
  %10730 = vmatpush1.msra.mxu0 0.0
  %10731 = vmatprep.subr.mxu0 0.0
  %10732 = vmatpush1.msra.mxu0 0.0
  %10733 = vmatprep.subr.mxu0 0.0
  %10734 = vmatpush1.msra.mxu0 0.0
  %10735 = vmatprep.subr.mxu0 0.0
  %10736 = vmatpush1.msra.mxu0 0.0
  %10737 = vmatprep.subr.mxu0 0.0
  %10738 = vmatpush1.msra.mxu0 0.0
  %10739 = vmatprep.subr.mxu0 0.0
  %10740 = vmatpush1.msra.mxu0 0.0
  %10741 = vmatprep.subr.mxu0 0.0
  %10742 = vmatpush1.msra.mxu0 0.0
  %10743 = vmatprep.subr.mxu0 0.0
  %10744 = vmatpush1.msra.mxu0 0.0
  %10745 = vmatprep.subr.mxu0 0.0
  %10746 = vmatpush1.msra.mxu0 0.0
  %10747 = vmatprep.subr.mxu0 0.0
  %10748 = vmatpush1.msra.mxu0 %v10524
  %10749 = vmatprep.subr.mxu0 0.0
  %10750 = vmatpush2.msra.mxu0 0.0
  %10751 = vmatprep.subr.mxu0 0.0
  %10752 = vmatpush2.msra.mxu0 0.0
  %10753 = vmatprep.subr.mxu0 0.0
  %10754 = vmatpush2.msra.mxu0 0.0
  %10755 = vmatprep.subr.mxu0 0.0
  %10756 = vmatpush2.msra.mxu0 0.0
  %10757 = vmatprep.subr.mxu0 0.0
  %10758 = vmatpush2.msra.mxu0 0.0
  %10759 = vmatprep.subr.mxu0 0.0
  %10760 = vmatpush2.msra.mxu0 0.0
  %10761 = vmatprep.subr.mxu0 0.0
  %10762 = vmatpush2.msra.mxu0 0.0
  %10763 = vmatprep.subr.mxu0 0.0
  %10764 = vmatpush2.msra.mxu0 0.0
  %10765 = vmatprep.subr.mxu0 0.0
  %10766 = vmatpush2.msra.mxu0 0.0
  %10767 = vmatprep.subr.mxu0 0.0
  %10768 = vmatpush2.msra.mxu0 0.0
  %10769 = vmatprep.subr.mxu0 0.0
  %10770 = vmatpush2.msra.mxu0 0.0
  %10771 = vmatprep.subr.mxu0 0.0
  %10772 = vmatpush2.msra.mxu0 0.0
  %10773 = vmatprep.subr.mxu0 0.0
  %10774 = vmatpush2.msra.mxu0 0.0
  %10775 = vmatprep.subr.mxu0 0.0
  %10776 = vmatpush2.msra.mxu0 0.0
  %10777 = vmatprep.subr.mxu0 0.0
  %10778 = vmatpush2.msra.mxu0 0.0
  %10779 = vmatprep.subr.mxu0 0.0
  %10780 = vmatpush2.msra.mxu0 0.0
  %10781 = vmatprep.mubr.f32.mxu0 0.0
  %10782 = vmatmul.mubr.f32.gmra.mxu0 %v10526
  %v10783 = vpop.f32.mrf.mxu0
  %v10784 = vadd.f32 0.0, %v10783
  %v10785 = vpop.f32.mrf.mxu0
  %10786 = vmatprep.mubr.f32.mxu0 0.0
  %10787 = vmatmul.mubr.f32.gmra.mxu0 %v10529
  %v10788 = vpop.f32.mrf.mxu0
  %v10789 = vadd.f32 0.0, %v10788
  %v10790 = vpop.f32.mrf.mxu0
  %10791 = vmatprep.mubr.f32.mxu0 0.0
  %10792 = vmatmul.mubr.f32.gmra.mxu0 %v10532
  %v10793 = vpop.f32.mrf.mxu0
  %v10794 = vadd.f32 0.0, %v10793
  %v10795 = vpop.f32.mrf.mxu0
  %10796 = vmatprep.mubr.f32.mxu0 0.0
  %10797 = vmatmul.mubr.f32.gmra.mxu0 %v10535
  %v10798 = vpop.f32.mrf.mxu0
  %v10799 = vadd.f32 0.0, %v10798
  %v10800 = vpop.f32.mrf.mxu0
  %10801 = vmatprep.mubr.f32.mxu0 0.0
  %10802 = vmatmul.mubr.f32.gmra.mxu0 %v10538
  %v10803 = vpop.f32.mrf.mxu0
  %v10804 = vadd.f32 0.0, %v10803
  %v10805 = vpop.f32.mrf.mxu0
  %10806 = vmatprep.mubr.f32.mxu0 0.0
  %10807 = vmatmul.mubr.f32.gmra.mxu0 %v10541
  %v10808 = vpop.f32.mrf.mxu0
  %v10809 = vadd.f32 0.0, %v10808
  %v10810 = vpop.f32.mrf.mxu0
  %10811 = vmatprep.mubr.f32.mxu0 0.0
  %10812 = vmatmul.mubr.f32.gmra.mxu0 %v10544
  %v10813 = vpop.f32.mrf.mxu0
  %v10814 = vadd.f32 0.0, %v10813
  %v10815 = vpop.f32.mrf.mxu0
  %10816 = vmatprep.mubr.f32.mxu0 0.0
  %10817 = vmatmul.mubr.f32.gmra.mxu0 %v10547
  %v10818 = vpop.f32.mrf.mxu0
  %v10819 = vadd.f32 0.0, %v10818
  %v10820 = vpop.f32.mrf.mxu0
  %10821 = vmatprep.mubr.f32.mxu0 0.0
  %10822 = vmatmul.mubr.f32.gmra.mxu0 %v10550
  %v10823 = vpop.f32.mrf.mxu0
  %v10824 = vadd.f32 0.0, %v10823
  %v10825 = vpop.f32.mrf.mxu0
  %10826 = vmatprep.mubr.f32.mxu0 0.0
  %10827 = vmatmul.mubr.f32.gmra.mxu0 %v10553
  %v10828 = vpop.f32.mrf.mxu0
  %v10829 = vadd.f32 0.0, %v10828
  %v10830 = vpop.f32.mrf.mxu0
  %10831 = vmatprep.mubr.f32.mxu0 0.0
  %10832 = vmatmul.mubr.f32.gmra.mxu0 %v10556
  %v10833 = vpop.f32.mrf.mxu0
  %v10834 = vadd.f32 0.0, %v10833
  %v10835 = vpop.f32.mrf.mxu0
  %10836 = vmatprep.mubr.f32.mxu0 0.0
  %10837 = vmatmul.mubr.f32.gmra.mxu0 %v10559
  %v10838 = vpop.f32.mrf.mxu0
  %v10839 = vadd.f32 0.0, %v10838
  %v10840 = vpop.f32.mrf.mxu0
  %10841 = vmatprep.mubr.f32.mxu0 0.0
  %10842 = vmatmul.mubr.f32.gmra.mxu0 %v10562
  %v10843 = vpop.f32.mrf.mxu0
  %v10844 = vadd.f32 0.0, %v10843
  %v10845 = vpop.f32.mrf.mxu0
  %10846 = vmatprep.mubr.f32.mxu0 0.0
  %10847 = vmatmul.mubr.f32.gmra.mxu0 %v10565
  %v10848 = vpop.f32.mrf.mxu0
  %v10849 = vadd.f32 0.0, %v10848
  %v10850 = vpop.f32.mrf.mxu0
  %10851 = vmatprep.mubr.f32.mxu0 0.0
  %10852 = vmatmul.mubr.f32.gmra.mxu0 %v10568
  %v10853 = vpop.f32.mrf.mxu0
  %v10854 = vadd.f32 0.0, %v10853
  %v10855 = vpop.f32.mrf.mxu0
  %10856 = vmatprep.mubr.f32.mxu0 0.0
  %10857 = vmatmul.mubr.f32.gmra.mxu0 %v10571
  %v10858 = vpop.f32.mrf.mxu0
  %v10859 = vadd.f32 0.0, %v10858
  %v10860 = vpop.f32.mrf.mxu0
  %10861 = vmatprep.mubr.f32.mxu0 0.0
  %10862 = vmatmul.mubr.f32.gmra.mxu0 %v10574
  %v10863 = vpop.f32.mrf.mxu0
  %v10864 = vadd.f32 0.0, %v10863
  %v10865 = vpop.f32.mrf.mxu0
  %10866 = vmatprep.mubr.f32.mxu0 0.0
  %10867 = vmatmul.mubr.f32.gmra.mxu0 %v10577
  %v10868 = vpop.f32.mrf.mxu0
  %v10869 = vadd.f32 0.0, %v10868
  %v10870 = vpop.f32.mrf.mxu0
  %10871 = vmatprep.mubr.f32.mxu0 0.0
  %10872 = vmatmul.mubr.f32.gmra.mxu0 %v10580
  %v10873 = vpop.f32.mrf.mxu0
  %v10874 = vadd.f32 0.0, %v10873
  %v10875 = vpop.f32.mrf.mxu0
  %10876 = vmatprep.mubr.f32.mxu0 0.0
  %10877 = vmatmul.mubr.f32.gmra.mxu0 %v10583
  %v10878 = vpop.f32.mrf.mxu0
  %v10879 = vadd.f32 0.0, %v10878
  %v10880 = vpop.f32.mrf.mxu0
  %10881 = vmatprep.mubr.f32.mxu0 0.0
  %10882 = vmatmul.mubr.f32.gmra.mxu0 %v10586
  %v10883 = vpop.f32.mrf.mxu0
  %v10884 = vadd.f32 0.0, %v10883
  %v10885 = vpop.f32.mrf.mxu0
  %10886 = vmatprep.mubr.f32.mxu0 0.0
  %10887 = vmatmul.mubr.f32.gmra.mxu0 %v10589
  %v10888 = vpop.f32.mrf.mxu0
  %v10889 = vadd.f32 0.0, %v10888
  %v10890 = vpop.f32.mrf.mxu0
  %10891 = vmatprep.mubr.f32.mxu0 0.0
  %10892 = vmatmul.mubr.f32.gmra.mxu0 %v10592
  %v10893 = vpop.f32.mrf.mxu0
  %v10894 = vadd.f32 0.0, %v10893
  %v10895 = vpop.f32.mrf.mxu0
  %10896 = vmatprep.mubr.f32.mxu0 0.0
  %10897 = vmatmul.mubr.f32.gmra.mxu0 %v10595
  %v10898 = vpop.f32.mrf.mxu0
  %v10899 = vadd.f32 0.0, %v10898
  %v10900 = vpop.f32.mrf.mxu0
  %10901 = vmatprep.mubr.f32.mxu0 0.0
  %10902 = vmatmul.mubr.f32.gmra.mxu0 %v10598
  %v10903 = vpop.f32.mrf.mxu0
  %v10904 = vadd.f32 0.0, %v10903
  %v10905 = vpop.f32.mrf.mxu0
  %10906 = vmatprep.mubr.f32.mxu0 0.0
  %10907 = vmatmul.mubr.f32.gmra.mxu0 %v10601
  %v10908 = vpop.f32.mrf.mxu0
  %v10909 = vadd.f32 0.0, %v10908
  %v10910 = vpop.f32.mrf.mxu0
  %10911 = vmatprep.mubr.f32.mxu0 0.0
  %10912 = vmatmul.mubr.f32.gmra.mxu0 %v10604
  %v10913 = vpop.f32.mrf.mxu0
  %v10914 = vadd.f32 0.0, %v10913
  %v10915 = vpop.f32.mrf.mxu0
  %10916 = vmatprep.mubr.f32.mxu0 0.0
  %10917 = vmatmul.mubr.f32.gmra.mxu0 %v10607
  %v10918 = vpop.f32.mrf.mxu0
  %v10919 = vadd.f32 0.0, %v10918
  %v10920 = vpop.f32.mrf.mxu0
  %10921 = vmatprep.mubr.f32.mxu0 0.0
  %10922 = vmatmul.mubr.f32.gmra.mxu0 %v10610
  %v10923 = vpop.f32.mrf.mxu0
  %v10924 = vadd.f32 0.0, %v10923
  %v10925 = vpop.f32.mrf.mxu0
  %10926 = vmatprep.mubr.f32.mxu0 0.0
  %10927 = vmatmul.mubr.f32.gmra.mxu0 %v10613
  %v10928 = vpop.f32.mrf.mxu0
  %v10929 = vadd.f32 0.0, %v10928
  %v10930 = vpop.f32.mrf.mxu0
  %10931 = vmatprep.mubr.f32.mxu0 0.0
  %10932 = vmatmul.mubr.f32.gmra.mxu0 %v10616
  %v10933 = vpop.f32.mrf.mxu0
  %v10934 = vadd.f32 0.0, %v10933
  %v10935 = vpop.f32.mrf.mxu0
  %10936 = vmatprep.mubr.f32.mxu0 0.0
  %10937 = vmatmul.mubr.f32.gmra.mxu0 %v10619
  %v10938 = vpop.f32.mrf.mxu0
  %v10939 = vadd.f32 0.0, %v10938
  %v10940 = vpop.f32.mrf.mxu0
  %10941 = vmatprep.mubr.f32.mxu0 0.0
  %10942 = vmatmul.mubr.f32.gmra.mxu0 %v10622
  %v10943 = vpop.f32.mrf.mxu0
  %v10944 = vadd.f32 0.0, %v10943
  %v10945 = vpop.f32.mrf.mxu0
  %10946 = vmatprep.mubr.f32.mxu0 0.0
  %10947 = vmatmul.mubr.f32.gmra.mxu0 %v10625
  %v10948 = vpop.f32.mrf.mxu0
  %v10949 = vadd.f32 0.0, %v10948
  %v10950 = vpop.f32.mrf.mxu0
  %10951 = vmatprep.mubr.f32.mxu0 0.0
  %10952 = vmatmul.mubr.f32.gmra.mxu0 %v10628
  %v10953 = vpop.f32.mrf.mxu0
  %v10954 = vadd.f32 0.0, %v10953
  %v10955 = vpop.f32.mrf.mxu0
  %10956 = vmatprep.mubr.f32.mxu0 0.0
  %10957 = vmatmul.mubr.f32.gmra.mxu0 %v10631
  %v10958 = vpop.f32.mrf.mxu0
  %v10959 = vadd.f32 0.0, %v10958
  %v10960 = vpop.f32.mrf.mxu0
  %10961 = vmatprep.mubr.f32.mxu0 0.0
  %10962 = vmatmul.mubr.f32.gmra.mxu0 %v10634
  %v10963 = vpop.f32.mrf.mxu0
  %v10964 = vadd.f32 0.0, %v10963
  %v10965 = vpop.f32.mrf.mxu0
  %10966 = vmatprep.mubr.f32.mxu0 0.0
  %10967 = vmatmul.mubr.f32.gmra.mxu0 %v10637
  %v10968 = vpop.f32.mrf.mxu0
  %v10969 = vadd.f32 0.0, %v10968
  %v10970 = vpop.f32.mrf.mxu0
  %10971 = vmatprep.mubr.f32.mxu0 0.0
  %10972 = vmatmul.mubr.f32.gmra.mxu0 %v10640
  %v10973 = vpop.f32.mrf.mxu0
  %v10974 = vadd.f32 0.0, %v10973
  %v10975 = vpop.f32.mrf.mxu0
  %10976 = vmatprep.mubr.f32.mxu0 0.0
  %10977 = vmatmul.mubr.f32.gmra.mxu0 %v10643
  %v10978 = vpop.f32.mrf.mxu0
  %v10979 = vadd.f32 0.0, %v10978
  %v10980 = vpop.f32.mrf.mxu0
  %10981 = vmatprep.mubr.f32.mxu0 0.0
  %10982 = vmatmul.mubr.f32.gmra.mxu0 %v10646
  %v10983 = vpop.f32.mrf.mxu0
  %v10984 = vadd.f32 0.0, %v10983
  %v10985 = vpop.f32.mrf.mxu0
  %10986 = vmatprep.mubr.f32.mxu0 0.0
  %10987 = vmatmul.mubr.f32.gmra.mxu0 %v10649
  %v10988 = vpop.f32.mrf.mxu0
  %v10989 = vadd.f32 0.0, %v10988
  %v10990 = vpop.f32.mrf.mxu0
  %10991 = vmatprep.mubr.f32.mxu0 0.0
  %10992 = vmatmul.mubr.f32.gmra.mxu0 %v10652
  %v10993 = vpop.f32.mrf.mxu0
  %v10994 = vadd.f32 0.0, %v10993
  %v10995 = vpop.f32.mrf.mxu0
  %10996 = vmatprep.mubr.f32.mxu0 0.0
  %10997 = vmatmul.mubr.f32.gmra.mxu0 %v10655
  %v10998 = vpop.f32.mrf.mxu0
  %v10999 = vadd.f32 0.0, %v10998
  %v11000 = vpop.f32.mrf.mxu0
  %11001 = vmatprep.mubr.f32.mxu0 0.0
  %11002 = vmatmul.mubr.f32.gmra.mxu0 %v10658
  %v11003 = vpop.f32.mrf.mxu0
  %v11004 = vadd.f32 0.0, %v11003
  %v11005 = vpop.f32.mrf.mxu0
  %11006 = vmatprep.mubr.f32.mxu0 0.0
  %11007 = vmatmul.mubr.f32.gmra.mxu0 %v10661
  %v11008 = vpop.f32.mrf.mxu0
  %v11009 = vadd.f32 0.0, %v11008
  %v11010 = vpop.f32.mrf.mxu0
  %11011 = vmatprep.mubr.f32.mxu0 0.0
  %11012 = vmatmul.mubr.f32.gmra.mxu0 %v10664
  %v11013 = vpop.f32.mrf.mxu0
  %v11014 = vadd.f32 0.0, %v11013
  %v11015 = vpop.f32.mrf.mxu0
  %11016 = vmatprep.mubr.f32.mxu0 0.0
  %11017 = vmatmul.mubr.f32.gmra.mxu0 %v10667
  %v11018 = vpop.f32.mrf.mxu0
  %v11019 = vadd.f32 0.0, %v11018
  %v11020 = vpop.f32.mrf.mxu0
  %11021 = vmatprep.mubr.f32.mxu0 0.0
  %11022 = vmatmul.mubr.f32.gmra.mxu0 %v10670
  %v11023 = vpop.f32.mrf.mxu0
  %v11024 = vadd.f32 0.0, %v11023
  %v11025 = vpop.f32.mrf.mxu0
  %11026 = vmatprep.mubr.f32.mxu0 0.0
  %11027 = vmatmul.mubr.f32.gmra.mxu0 %v10673
  %v11028 = vpop.f32.mrf.mxu0
  %v11029 = vadd.f32 0.0, %v11028
  %v11030 = vpop.f32.mrf.mxu0
  %11031 = vmatprep.mubr.f32.mxu0 0.0
  %11032 = vmatmul.mubr.f32.gmra.mxu0 %v10676
  %v11033 = vpop.f32.mrf.mxu0
  %v11034 = vadd.f32 0.0, %v11033
  %v11035 = vpop.f32.mrf.mxu0
  %11036 = vmatprep.mubr.f32.mxu0 0.0
  %11037 = vmatmul.mubr.f32.gmra.mxu0 %v10679
  %v11038 = vpop.f32.mrf.mxu0
  %v11039 = vadd.f32 0.0, %v11038
  %v11040 = vpop.f32.mrf.mxu0
  %11041 = vmatprep.mubr.f32.mxu0 0.0
  %11042 = vmatmul.mubr.f32.gmra.mxu0 %v10682
  %v11043 = vpop.f32.mrf.mxu0
  %v11044 = vadd.f32 0.0, %v11043
  %v11045 = vpop.f32.mrf.mxu0
  %11046 = vmatprep.mubr.f32.mxu0 0.0
  %11047 = vmatmul.mubr.f32.gmra.mxu0 %v10685
  %v11048 = vpop.f32.mrf.mxu0
  %v11049 = vadd.f32 0.0, %v11048
  %v11050 = vpop.f32.mrf.mxu0
  %11051 = vmatprep.mubr.f32.mxu0 0.0
  %11052 = vmatmul.mubr.f32.gmra.mxu0 %v10688
  %v11053 = vpop.f32.mrf.mxu0
  %v11054 = vadd.f32 0.0, %v11053
  %v11055 = vpop.f32.mrf.mxu0
  %11056 = vmatprep.mubr.f32.mxu0 0.0
  %11057 = vmatmul.mubr.f32.gmra.mxu0 %v10691
  %v11058 = vpop.f32.mrf.mxu0
  %v11059 = vadd.f32 0.0, %v11058
  %v11060 = vpop.f32.mrf.mxu0
  %11061 = vmatprep.mubr.f32.mxu0 0.0
  %11062 = vmatmul.mubr.f32.gmra.mxu0 %v10694
  %v11063 = vpop.f32.mrf.mxu0
  %v11064 = vadd.f32 0.0, %v11063
  %v11065 = vpop.f32.mrf.mxu0
  %11066 = vmatprep.mubr.f32.mxu0 0.0
  %11067 = vmatmul.mubr.f32.gmra.mxu0 %v10697
  %v11068 = vpop.f32.mrf.mxu0
  %v11069 = vadd.f32 0.0, %v11068
  %v11070 = vpop.f32.mrf.mxu0
  %11071 = vmatprep.mubr.f32.mxu0 0.0
  %11072 = vmatmul.mubr.f32.gmra.mxu0 %v10700
  %v11073 = vpop.f32.mrf.mxu0
  %v11074 = vadd.f32 0.0, %v11073
  %v11075 = vpop.f32.mrf.mxu0
  %11076 = vmatprep.mubr.f32.mxu0 0.0
  %11077 = vmatmul.mubr.f32.gmra.mxu0 %v10703
  %v11078 = vpop.f32.mrf.mxu0
  %v11079 = vadd.f32 0.0, %v11078
  %v11080 = vpop.f32.mrf.mxu0
  %11081 = vmatprep.mubr.f32.mxu0 0.0
  %11082 = vmatmul.mubr.f32.gmra.mxu0 %v10706
  %v11083 = vpop.f32.mrf.mxu0
  %v11084 = vadd.f32 0.0, %v11083
  %v11085 = vpop.f32.mrf.mxu0
  %11086 = vmatprep.mubr.f32.mxu0 0.0
  %11087 = vmatmul.mubr.f32.gmra.mxu0 %v10709
  %v11088 = vpop.f32.mrf.mxu0
  %v11089 = vadd.f32 0.0, %v11088
  %v11090 = vpop.f32.mrf.mxu0
  %11091 = vmatprep.mubr.f32.mxu0 0.0
  %11092 = vmatmul.mubr.f32.gmra.mxu0 %v10712
  %v11093 = vpop.f32.mrf.mxu0
  %v11094 = vadd.f32 0.0, %v11093
  %v11095 = vpop.f32.mrf.mxu0
  %11096 = vmatprep.mubr.f32.mxu0 0.0
  %11097 = vmatmul.mubr.f32.gmra.mxu0 %v10715
  %v11098 = vpop.f32.mrf.mxu0
  %v11099 = vadd.f32 0.0, %v11098
  %v11100 = vpop.f32.mrf.mxu0
  %11101 = vdwg.mxu0
  %v11102 = vadd.f32 %v10395, %v10784
  %v11103 = vadd.f32 %v10396, %v10789
  %v11104 = vadd.f32 %v10397, %v10794
  %v11105 = vadd.f32 %v10398, %v10799
  %v11106 = vadd.f32 %v10399, %v10804
  %v11107 = vadd.f32 %v10400, %v10809
  %v11108 = vadd.f32 %v10401, %v10814
  %v11109 = vadd.f32 %v10402, %v10819
  %v11110 = vadd.f32 %v10403, %v10824
  %v11111 = vadd.f32 %v10404, %v10829
  %v11112 = vadd.f32 %v10405, %v10834
  %v11113 = vadd.f32 %v10406, %v10839
  %v11114 = vadd.f32 %v10407, %v10844
  %v11115 = vadd.f32 %v10408, %v10849
  %v11116 = vadd.f32 %v10409, %v10854
  %v11117 = vadd.f32 %v10410, %v10859
  %v11118 = vadd.f32 %v10411, %v10864
  %v11119 = vadd.f32 %v10412, %v10869
  %v11120 = vadd.f32 %v10413, %v10874
  %v11121 = vadd.f32 %v10414, %v10879
  %v11122 = vadd.f32 %v10415, %v10884
  %v11123 = vadd.f32 %v10416, %v10889
  %v11124 = vadd.f32 %v10417, %v10894
  %v11125 = vadd.f32 %v10418, %v10899
  %v11126 = vadd.f32 %v10419, %v10904
  %v11127 = vadd.f32 %v10420, %v10909
  %v11128 = vadd.f32 %v10421, %v10914
  %v11129 = vadd.f32 %v10422, %v10919
  %v11130 = vadd.f32 %v10423, %v10924
  %v11131 = vadd.f32 %v10424, %v10929
  %v11132 = vadd.f32 %v10425, %v10934
  %v11133 = vadd.f32 %v10426, %v10939
  %v11134 = vadd.f32 %v10427, %v10944
  %v11135 = vadd.f32 %v10428, %v10949
  %v11136 = vadd.f32 %v10429, %v10954
  %v11137 = vadd.f32 %v10430, %v10959
  %v11138 = vadd.f32 %v10431, %v10964
  %v11139 = vadd.f32 %v10432, %v10969
  %v11140 = vadd.f32 %v10433, %v10974
  %v11141 = vadd.f32 %v10434, %v10979
  %v11142 = vadd.f32 %v10435, %v10984
  %v11143 = vadd.f32 %v10436, %v10989
  %v11144 = vadd.f32 %v10437, %v10994
  %v11145 = vadd.f32 %v10438, %v10999
  %v11146 = vadd.f32 %v10439, %v11004
  %v11147 = vadd.f32 %v10440, %v11009
  %v11148 = vadd.f32 %v10441, %v11014
  %v11149 = vadd.f32 %v10442, %v11019
  %v11150 = vadd.f32 %v10443, %v11024
  %v11151 = vadd.f32 %v10444, %v11029
  %v11152 = vadd.f32 %v10445, %v11034
  %v11153 = vadd.f32 %v10446, %v11039
  %v11154 = vadd.f32 %v10447, %v11044
  %v11155 = vadd.f32 %v10448, %v11049
  %v11156 = vadd.f32 %v10449, %v11054
  %v11157 = vadd.f32 %v10450, %v11059
  %v11158 = vadd.f32 %v10451, %v11064
  %v11159 = vadd.f32 %v10452, %v11069
  %v11160 = vadd.f32 %v10453, %v11074
  %v11161 = vadd.f32 %v10454, %v11079
  %v11162 = vadd.f32 %v10455, %v11084
  %v11163 = vadd.f32 %v10456, %v11089
  %v11164 = vadd.f32 %v10457, %v11094
  %v11165 = vadd.f32 %v10458, %v11099
  %s11166 = scalar_lea.vmem [#allocation2], 48
  %v11167 = vld [vmem:[%s11166] sm:$0xff]
  %v11168 = vld [vmem:[%s11166 + $0x8] sm:$0xff]
  %v11169 = vld [vmem:[%s11166 + $0x18] sm:$0xff]
  %v11170 = vld [vmem:[%s11166 + $0x20] sm:$0xff]
  %v11171 = vld [vmem:[%s11166 + $0x30] sm:$0xff]
  %v11172 = vld [vmem:[%s11166 + $0x38] sm:$0xff]
  %v11173 = vld [vmem:[%s11166 + $0x48] sm:$0xff]
  %v11174 = vld [vmem:[%s11166 + $0x50] sm:$0xff]
  %v11175 = vld [vmem:[%s11166 + $0x60] sm:$0xff]
  %v11176 = vld [vmem:[%s11166 + $0x68] sm:$0xff]
  %v11177 = vld [vmem:[%s11166 + $0x78] sm:$0xff]
  %v11178 = vld [vmem:[%s11166 + $0x80] sm:$0xff]
  %v11179 = vld [vmem:[%s11166 + $0x90] sm:$0xff]
  %v11180 = vld [vmem:[%s11166 + $0x98] sm:$0xff]
  %v11181 = vld [vmem:[%s11166 + $0xa8] sm:$0xff]
  %v11182 = vld [vmem:[%s11166 + $0xb0] sm:$0xff]
  %v11183 = vld [vmem:[%s11166 + $0xc0] sm:$0xff]
  %v11184 = vld [vmem:[%s11166 + $0xc8] sm:$0xff]
  %v11185 = vld [vmem:[%s11166 + $0xd8] sm:$0xff]
  %v11186 = vld [vmem:[%s11166 + $0xe0] sm:$0xff]
  %v11187 = vld [vmem:[%s11166 + $0xf0] sm:$0xff]
  %v11188 = vld [vmem:[%s11166 + $0xf8] sm:$0xff]
  %v11189 = vld [vmem:[%s11166 + $0x108] sm:$0xff]
  %v11190 = vld [vmem:[%s11166 + $0x110] sm:$0xff]
  %v11191 = vld [vmem:[%s11166 + $0x120] sm:$0xff]
  %v11192 = vld [vmem:[%s11166 + $0x128] sm:$0xff]
  %v11193 = vld [vmem:[%s11166 + $0x138] sm:$0xff]
  %v11194 = vld [vmem:[%s11166 + $0x140] sm:$0xff]
  %v11195 = vld [vmem:[%s11166 + $0x150] sm:$0xff]
  %v11196 = vld [vmem:[%s11166 + $0x158] sm:$0xff]
  %v11197 = vld [vmem:[%s11166 + $0x168] sm:$0xff]
  %v11198 = vld [vmem:[%s11166 + $0x170] sm:$0xff]
  %v11199 = vld [vmem:[%s11166 + $0x1b0] sm:$0xff]
  %v11200 = vld [vmem:[%s11166 + $0x1b8] sm:$0xff]
  %v11201 = vld [vmem:[%s11166 + $0x1c8] sm:$0xff]
  %v11202 = vld [vmem:[%s11166 + $0x1d0] sm:$0xff]
  %v11203 = vld [vmem:[%s11166 + $0x1e0] sm:$0xff]
  %v11204 = vld [vmem:[%s11166 + $0x1e8] sm:$0xff]
  %v11205 = vld [vmem:[%s11166 + $0x1f8] sm:$0xff]
  %v11206 = vld [vmem:[%s11166 + $0x200] sm:$0xff]
  %v11207 = vld [vmem:[%s11166 + $0x210] sm:$0xff]
  %v11208 = vld [vmem:[%s11166 + $0x218] sm:$0xff]
  %v11209 = vld [vmem:[%s11166 + $0x228] sm:$0xff]
  %v11210 = vld [vmem:[%s11166 + $0x230] sm:$0xff]
  %v11211 = vld [vmem:[%s11166 + $0x240] sm:$0xff]
  %v11212 = vld [vmem:[%s11166 + $0x248] sm:$0xff]
  %v11213 = vld [vmem:[%s11166 + $0x258] sm:$0xff]
  %v11214 = vld [vmem:[%s11166 + $0x260] sm:$0xff]
  %v11215 = vld [vmem:[%s11166 + $0x270] sm:$0xff]
  %v11216 = vld [vmem:[%s11166 + $0x278] sm:$0xff]
  %v11217 = vld [vmem:[%s11166 + $0x288] sm:$0xff]
  %v11218 = vld [vmem:[%s11166 + $0x290] sm:$0xff]
  %v11219 = vld [vmem:[%s11166 + $0x2a0] sm:$0xff]
  %v11220 = vld [vmem:[%s11166 + $0x2a8] sm:$0xff]
  %v11221 = vld [vmem:[%s11166 + $0x2b8] sm:$0xff]
  %v11222 = vld [vmem:[%s11166 + $0x2c0] sm:$0xff]
  %v11223 = vld [vmem:[%s11166 + $0x2d0] sm:$0xff]
  %v11224 = vld [vmem:[%s11166 + $0x2d8] sm:$0xff]
  %v11225 = vld [vmem:[%s11166 + $0x2e8] sm:$0xff]
  %v11226 = vld [vmem:[%s11166 + $0x2f0] sm:$0xff]
  %v11227 = vld [vmem:[%s11166 + $0x300] sm:$0xff]
  %v11228 = vld [vmem:[%s11166 + $0x308] sm:$0xff]
  %v11229 = vld [vmem:[%s11166 + $0x318] sm:$0xff]
  %v11230 = vld [vmem:[%s11166 + $0x320] sm:$0xff]
  %s11231 = scalar_lea.vmem %s2, 48
  %v11232 = vld [vmem:[%s11231] sm:$0xff]
  %v11234 = vsel %vm6360, %v11167, 0
  %v11237 = vsel %vm6360, %v11168, 0
  %v11240 = vsel %vm6360, %v11169, 0
  %v11243 = vsel %vm6360, %v11170, 0
  %v11246 = vsel %vm6360, %v11171, 0
  %v11249 = vsel %vm6360, %v11172, 0
  %v11252 = vsel %vm6360, %v11173, 0
  %v11255 = vsel %vm6360, %v11174, 0
  %v11258 = vsel %vm6360, %v11175, 0
  %v11261 = vsel %vm6360, %v11176, 0
  %v11264 = vsel %vm6360, %v11177, 0
  %v11267 = vsel %vm6360, %v11178, 0
  %v11270 = vsel %vm6360, %v11179, 0
  %v11273 = vsel %vm6360, %v11180, 0
  %v11276 = vsel %vm6360, %v11181, 0
  %v11279 = vsel %vm6360, %v11182, 0
  %v11282 = vsel %vm6360, %v11183, 0
  %v11285 = vsel %vm6360, %v11184, 0
  %v11288 = vsel %vm6360, %v11185, 0
  %v11291 = vsel %vm6360, %v11186, 0
  %v11294 = vsel %vm6360, %v11187, 0
  %v11297 = vsel %vm6360, %v11188, 0
  %v11300 = vsel %vm6360, %v11189, 0
  %v11303 = vsel %vm6360, %v11190, 0
  %v11306 = vsel %vm6360, %v11191, 0
  %v11309 = vsel %vm6360, %v11192, 0
  %v11312 = vsel %vm6360, %v11193, 0
  %v11315 = vsel %vm6360, %v11194, 0
  %v11318 = vsel %vm6360, %v11195, 0
  %v11321 = vsel %vm6360, %v11196, 0
  %v11324 = vsel %vm6360, %v11197, 0
  %v11327 = vsel %vm6360, %v11198, 0
  %v11330 = vsel %vm6360, %v11199, 0
  %v11333 = vsel %vm6360, %v11200, 0
  %v11336 = vsel %vm6360, %v11201, 0
  %v11339 = vsel %vm6360, %v11202, 0
  %v11342 = vsel %vm6360, %v11203, 0
  %v11345 = vsel %vm6360, %v11204, 0
  %v11348 = vsel %vm6360, %v11205, 0
  %v11351 = vsel %vm6360, %v11206, 0
  %v11354 = vsel %vm6360, %v11207, 0
  %v11357 = vsel %vm6360, %v11208, 0
  %v11360 = vsel %vm6360, %v11209, 0
  %v11363 = vsel %vm6360, %v11210, 0
  %v11366 = vsel %vm6360, %v11211, 0
  %v11369 = vsel %vm6360, %v11212, 0
  %v11372 = vsel %vm6360, %v11213, 0
  %v11375 = vsel %vm6360, %v11214, 0
  %v11378 = vsel %vm6360, %v11215, 0
  %v11381 = vsel %vm6360, %v11216, 0
  %v11384 = vsel %vm6360, %v11217, 0
  %v11387 = vsel %vm6360, %v11218, 0
  %v11390 = vsel %vm6360, %v11219, 0
  %v11393 = vsel %vm6360, %v11220, 0
  %v11396 = vsel %vm6360, %v11221, 0
  %v11399 = vsel %vm6360, %v11222, 0
  %v11402 = vsel %vm6360, %v11223, 0
  %v11405 = vsel %vm6360, %v11224, 0
  %v11408 = vsel %vm6360, %v11225, 0
  %v11411 = vsel %vm6360, %v11226, 0
  %v11414 = vsel %vm6360, %v11227, 0
  %v11417 = vsel %vm6360, %v11228, 0
  %v11420 = vsel %vm6360, %v11229, 0
  %v11423 = vsel %vm6360, %v11230, 0
  %11425 = vmatprep.subr.mxu0 0.0
  %11426 = vmatpush1.msra.mxu0 0.0
  %11427 = vmatprep.subr.mxu0 0.0
  %11428 = vmatpush1.msra.mxu0 0.0
  %11429 = vmatprep.subr.mxu0 0.0
  %11430 = vmatpush1.msra.mxu0 0.0
  %11431 = vmatprep.subr.mxu0 0.0
  %11432 = vmatpush1.msra.mxu0 0.0
  %11433 = vmatprep.subr.mxu0 0.0
  %11434 = vmatpush1.msra.mxu0 0.0
  %11435 = vmatprep.subr.mxu0 0.0
  %11436 = vmatpush1.msra.mxu0 0.0
  %11437 = vmatprep.subr.mxu0 0.0
  %11438 = vmatpush1.msra.mxu0 0.0
  %11439 = vmatprep.subr.mxu0 0.0
  %11440 = vmatpush1.msra.mxu0 0.0
  %11441 = vmatprep.subr.mxu0 0.0
  %11442 = vmatpush1.msra.mxu0 0.0
  %11443 = vmatprep.subr.mxu0 0.0
  %11444 = vmatpush1.msra.mxu0 0.0
  %11445 = vmatprep.subr.mxu0 0.0
  %11446 = vmatpush1.msra.mxu0 0.0
  %11447 = vmatprep.subr.mxu0 0.0
  %11448 = vmatpush1.msra.mxu0 0.0
  %11449 = vmatprep.subr.mxu0 0.0
  %11450 = vmatpush1.msra.mxu0 0.0
  %11451 = vmatprep.subr.mxu0 0.0
  %11452 = vmatpush1.msra.mxu0 0.0
  %11453 = vmatprep.subr.mxu0 0.0
  %11454 = vmatpush1.msra.mxu0 0.0
  %11455 = vmatprep.subr.mxu0 0.0
  %11456 = vmatpush1.msra.mxu0 %v11232
  %11457 = vmatprep.subr.mxu0 0.0
  %11458 = vmatpush2.msra.mxu0 0.0
  %11459 = vmatprep.subr.mxu0 0.0
  %11460 = vmatpush2.msra.mxu0 0.0
  %11461 = vmatprep.subr.mxu0 0.0
  %11462 = vmatpush2.msra.mxu0 0.0
  %11463 = vmatprep.subr.mxu0 0.0
  %11464 = vmatpush2.msra.mxu0 0.0
  %11465 = vmatprep.subr.mxu0 0.0
  %11466 = vmatpush2.msra.mxu0 0.0
  %11467 = vmatprep.subr.mxu0 0.0
  %11468 = vmatpush2.msra.mxu0 0.0
  %11469 = vmatprep.subr.mxu0 0.0
  %11470 = vmatpush2.msra.mxu0 0.0
  %11471 = vmatprep.subr.mxu0 0.0
  %11472 = vmatpush2.msra.mxu0 0.0
  %11473 = vmatprep.subr.mxu0 0.0
  %11474 = vmatpush2.msra.mxu0 0.0
  %11475 = vmatprep.subr.mxu0 0.0
  %11476 = vmatpush2.msra.mxu0 0.0
  %11477 = vmatprep.subr.mxu0 0.0
  %11478 = vmatpush2.msra.mxu0 0.0
  %11479 = vmatprep.subr.mxu0 0.0
  %11480 = vmatpush2.msra.mxu0 0.0
  %11481 = vmatprep.subr.mxu0 0.0
  %11482 = vmatpush2.msra.mxu0 0.0
  %11483 = vmatprep.subr.mxu0 0.0
  %11484 = vmatpush2.msra.mxu0 0.0
  %11485 = vmatprep.subr.mxu0 0.0
  %11486 = vmatpush2.msra.mxu0 0.0
  %11487 = vmatprep.subr.mxu0 0.0
  %11488 = vmatpush2.msra.mxu0 0.0
  %11489 = vmatprep.mubr.f32.mxu0 0.0
  %11490 = vmatmul.mubr.f32.gmra.mxu0 %v11234
  %v11491 = vpop.f32.mrf.mxu0
  %v11492 = vadd.f32 0.0, %v11491
  %v11493 = vpop.f32.mrf.mxu0
  %11494 = vmatprep.mubr.f32.mxu0 0.0
  %11495 = vmatmul.mubr.f32.gmra.mxu0 %v11237
  %v11496 = vpop.f32.mrf.mxu0
  %v11497 = vadd.f32 0.0, %v11496
  %v11498 = vpop.f32.mrf.mxu0
  %11499 = vmatprep.mubr.f32.mxu0 0.0
  %11500 = vmatmul.mubr.f32.gmra.mxu0 %v11240
  %v11501 = vpop.f32.mrf.mxu0
  %v11502 = vadd.f32 0.0, %v11501
  %v11503 = vpop.f32.mrf.mxu0
  %11504 = vmatprep.mubr.f32.mxu0 0.0
  %11505 = vmatmul.mubr.f32.gmra.mxu0 %v11243
  %v11506 = vpop.f32.mrf.mxu0
  %v11507 = vadd.f32 0.0, %v11506
  %v11508 = vpop.f32.mrf.mxu0
  %11509 = vmatprep.mubr.f32.mxu0 0.0
  %11510 = vmatmul.mubr.f32.gmra.mxu0 %v11246
  %v11511 = vpop.f32.mrf.mxu0
  %v11512 = vadd.f32 0.0, %v11511
  %v11513 = vpop.f32.mrf.mxu0
  %11514 = vmatprep.mubr.f32.mxu0 0.0
  %11515 = vmatmul.mubr.f32.gmra.mxu0 %v11249
  %v11516 = vpop.f32.mrf.mxu0
  %v11517 = vadd.f32 0.0, %v11516
  %v11518 = vpop.f32.mrf.mxu0
  %11519 = vmatprep.mubr.f32.mxu0 0.0
  %11520 = vmatmul.mubr.f32.gmra.mxu0 %v11252
  %v11521 = vpop.f32.mrf.mxu0
  %v11522 = vadd.f32 0.0, %v11521
  %v11523 = vpop.f32.mrf.mxu0
  %11524 = vmatprep.mubr.f32.mxu0 0.0
  %11525 = vmatmul.mubr.f32.gmra.mxu0 %v11255
  %v11526 = vpop.f32.mrf.mxu0
  %v11527 = vadd.f32 0.0, %v11526
  %v11528 = vpop.f32.mrf.mxu0
  %11529 = vmatprep.mubr.f32.mxu0 0.0
  %11530 = vmatmul.mubr.f32.gmra.mxu0 %v11258
  %v11531 = vpop.f32.mrf.mxu0
  %v11532 = vadd.f32 0.0, %v11531
  %v11533 = vpop.f32.mrf.mxu0
  %11534 = vmatprep.mubr.f32.mxu0 0.0
  %11535 = vmatmul.mubr.f32.gmra.mxu0 %v11261
  %v11536 = vpop.f32.mrf.mxu0
  %v11537 = vadd.f32 0.0, %v11536
  %v11538 = vpop.f32.mrf.mxu0
  %11539 = vmatprep.mubr.f32.mxu0 0.0
  %11540 = vmatmul.mubr.f32.gmra.mxu0 %v11264
  %v11541 = vpop.f32.mrf.mxu0
  %v11542 = vadd.f32 0.0, %v11541
  %v11543 = vpop.f32.mrf.mxu0
  %11544 = vmatprep.mubr.f32.mxu0 0.0
  %11545 = vmatmul.mubr.f32.gmra.mxu0 %v11267
  %v11546 = vpop.f32.mrf.mxu0
  %v11547 = vadd.f32 0.0, %v11546
  %v11548 = vpop.f32.mrf.mxu0
  %11549 = vmatprep.mubr.f32.mxu0 0.0
  %11550 = vmatmul.mubr.f32.gmra.mxu0 %v11270
  %v11551 = vpop.f32.mrf.mxu0
  %v11552 = vadd.f32 0.0, %v11551
  %v11553 = vpop.f32.mrf.mxu0
  %11554 = vmatprep.mubr.f32.mxu0 0.0
  %11555 = vmatmul.mubr.f32.gmra.mxu0 %v11273
  %v11556 = vpop.f32.mrf.mxu0
  %v11557 = vadd.f32 0.0, %v11556
  %v11558 = vpop.f32.mrf.mxu0
  %11559 = vmatprep.mubr.f32.mxu0 0.0
  %11560 = vmatmul.mubr.f32.gmra.mxu0 %v11276
  %v11561 = vpop.f32.mrf.mxu0
  %v11562 = vadd.f32 0.0, %v11561
  %v11563 = vpop.f32.mrf.mxu0
  %11564 = vmatprep.mubr.f32.mxu0 0.0
  %11565 = vmatmul.mubr.f32.gmra.mxu0 %v11279
  %v11566 = vpop.f32.mrf.mxu0
  %v11567 = vadd.f32 0.0, %v11566
  %v11568 = vpop.f32.mrf.mxu0
  %11569 = vmatprep.mubr.f32.mxu0 0.0
  %11570 = vmatmul.mubr.f32.gmra.mxu0 %v11282
  %v11571 = vpop.f32.mrf.mxu0
  %v11572 = vadd.f32 0.0, %v11571
  %v11573 = vpop.f32.mrf.mxu0
  %11574 = vmatprep.mubr.f32.mxu0 0.0
  %11575 = vmatmul.mubr.f32.gmra.mxu0 %v11285
  %v11576 = vpop.f32.mrf.mxu0
  %v11577 = vadd.f32 0.0, %v11576
  %v11578 = vpop.f32.mrf.mxu0
  %11579 = vmatprep.mubr.f32.mxu0 0.0
  %11580 = vmatmul.mubr.f32.gmra.mxu0 %v11288
  %v11581 = vpop.f32.mrf.mxu0
  %v11582 = vadd.f32 0.0, %v11581
  %v11583 = vpop.f32.mrf.mxu0
  %11584 = vmatprep.mubr.f32.mxu0 0.0
  %11585 = vmatmul.mubr.f32.gmra.mxu0 %v11291
  %v11586 = vpop.f32.mrf.mxu0
  %v11587 = vadd.f32 0.0, %v11586
  %v11588 = vpop.f32.mrf.mxu0
  %11589 = vmatprep.mubr.f32.mxu0 0.0
  %11590 = vmatmul.mubr.f32.gmra.mxu0 %v11294
  %v11591 = vpop.f32.mrf.mxu0
  %v11592 = vadd.f32 0.0, %v11591
  %v11593 = vpop.f32.mrf.mxu0
  %11594 = vmatprep.mubr.f32.mxu0 0.0
  %11595 = vmatmul.mubr.f32.gmra.mxu0 %v11297
  %v11596 = vpop.f32.mrf.mxu0
  %v11597 = vadd.f32 0.0, %v11596
  %v11598 = vpop.f32.mrf.mxu0
  %11599 = vmatprep.mubr.f32.mxu0 0.0
  %11600 = vmatmul.mubr.f32.gmra.mxu0 %v11300
  %v11601 = vpop.f32.mrf.mxu0
  %v11602 = vadd.f32 0.0, %v11601
  %v11603 = vpop.f32.mrf.mxu0
  %11604 = vmatprep.mubr.f32.mxu0 0.0
  %11605 = vmatmul.mubr.f32.gmra.mxu0 %v11303
  %v11606 = vpop.f32.mrf.mxu0
  %v11607 = vadd.f32 0.0, %v11606
  %v11608 = vpop.f32.mrf.mxu0
  %11609 = vmatprep.mubr.f32.mxu0 0.0
  %11610 = vmatmul.mubr.f32.gmra.mxu0 %v11306
  %v11611 = vpop.f32.mrf.mxu0
  %v11612 = vadd.f32 0.0, %v11611
  %v11613 = vpop.f32.mrf.mxu0
  %11614 = vmatprep.mubr.f32.mxu0 0.0
  %11615 = vmatmul.mubr.f32.gmra.mxu0 %v11309
  %v11616 = vpop.f32.mrf.mxu0
  %v11617 = vadd.f32 0.0, %v11616
  %v11618 = vpop.f32.mrf.mxu0
  %11619 = vmatprep.mubr.f32.mxu0 0.0
  %11620 = vmatmul.mubr.f32.gmra.mxu0 %v11312
  %v11621 = vpop.f32.mrf.mxu0
  %v11622 = vadd.f32 0.0, %v11621
  %v11623 = vpop.f32.mrf.mxu0
  %11624 = vmatprep.mubr.f32.mxu0 0.0
  %11625 = vmatmul.mubr.f32.gmra.mxu0 %v11315
  %v11626 = vpop.f32.mrf.mxu0
  %v11627 = vadd.f32 0.0, %v11626
  %v11628 = vpop.f32.mrf.mxu0
  %11629 = vmatprep.mubr.f32.mxu0 0.0
  %11630 = vmatmul.mubr.f32.gmra.mxu0 %v11318
  %v11631 = vpop.f32.mrf.mxu0
  %v11632 = vadd.f32 0.0, %v11631
  %v11633 = vpop.f32.mrf.mxu0
  %11634 = vmatprep.mubr.f32.mxu0 0.0
  %11635 = vmatmul.mubr.f32.gmra.mxu0 %v11321
  %v11636 = vpop.f32.mrf.mxu0
  %v11637 = vadd.f32 0.0, %v11636
  %v11638 = vpop.f32.mrf.mxu0
  %11639 = vmatprep.mubr.f32.mxu0 0.0
  %11640 = vmatmul.mubr.f32.gmra.mxu0 %v11324
  %v11641 = vpop.f32.mrf.mxu0
  %v11642 = vadd.f32 0.0, %v11641
  %v11643 = vpop.f32.mrf.mxu0
  %11644 = vmatprep.mubr.f32.mxu0 0.0
  %11645 = vmatmul.mubr.f32.gmra.mxu0 %v11327
  %v11646 = vpop.f32.mrf.mxu0
  %v11647 = vadd.f32 0.0, %v11646
  %v11648 = vpop.f32.mrf.mxu0
  %11649 = vmatprep.mubr.f32.mxu0 0.0
  %11650 = vmatmul.mubr.f32.gmra.mxu0 %v11330
  %v11651 = vpop.f32.mrf.mxu0
  %v11652 = vadd.f32 0.0, %v11651
  %v11653 = vpop.f32.mrf.mxu0
  %11654 = vmatprep.mubr.f32.mxu0 0.0
  %11655 = vmatmul.mubr.f32.gmra.mxu0 %v11333
  %v11656 = vpop.f32.mrf.mxu0
  %v11657 = vadd.f32 0.0, %v11656
  %v11658 = vpop.f32.mrf.mxu0
  %11659 = vmatprep.mubr.f32.mxu0 0.0
  %11660 = vmatmul.mubr.f32.gmra.mxu0 %v11336
  %v11661 = vpop.f32.mrf.mxu0
  %v11662 = vadd.f32 0.0, %v11661
  %v11663 = vpop.f32.mrf.mxu0
  %11664 = vmatprep.mubr.f32.mxu0 0.0
  %11665 = vmatmul.mubr.f32.gmra.mxu0 %v11339
  %v11666 = vpop.f32.mrf.mxu0
  %v11667 = vadd.f32 0.0, %v11666
  %v11668 = vpop.f32.mrf.mxu0
  %11669 = vmatprep.mubr.f32.mxu0 0.0
  %11670 = vmatmul.mubr.f32.gmra.mxu0 %v11342
  %v11671 = vpop.f32.mrf.mxu0
  %v11672 = vadd.f32 0.0, %v11671
  %v11673 = vpop.f32.mrf.mxu0
  %11674 = vmatprep.mubr.f32.mxu0 0.0
  %11675 = vmatmul.mubr.f32.gmra.mxu0 %v11345
  %v11676 = vpop.f32.mrf.mxu0
  %v11677 = vadd.f32 0.0, %v11676
  %v11678 = vpop.f32.mrf.mxu0
  %11679 = vmatprep.mubr.f32.mxu0 0.0
  %11680 = vmatmul.mubr.f32.gmra.mxu0 %v11348
  %v11681 = vpop.f32.mrf.mxu0
  %v11682 = vadd.f32 0.0, %v11681
  %v11683 = vpop.f32.mrf.mxu0
  %11684 = vmatprep.mubr.f32.mxu0 0.0
  %11685 = vmatmul.mubr.f32.gmra.mxu0 %v11351
  %v11686 = vpop.f32.mrf.mxu0
  %v11687 = vadd.f32 0.0, %v11686
  %v11688 = vpop.f32.mrf.mxu0
  %11689 = vmatprep.mubr.f32.mxu0 0.0
  %11690 = vmatmul.mubr.f32.gmra.mxu0 %v11354
  %v11691 = vpop.f32.mrf.mxu0
  %v11692 = vadd.f32 0.0, %v11691
  %v11693 = vpop.f32.mrf.mxu0
  %11694 = vmatprep.mubr.f32.mxu0 0.0
  %11695 = vmatmul.mubr.f32.gmra.mxu0 %v11357
  %v11696 = vpop.f32.mrf.mxu0
  %v11697 = vadd.f32 0.0, %v11696
  %v11698 = vpop.f32.mrf.mxu0
  %11699 = vmatprep.mubr.f32.mxu0 0.0
  %11700 = vmatmul.mubr.f32.gmra.mxu0 %v11360
  %v11701 = vpop.f32.mrf.mxu0
  %v11702 = vadd.f32 0.0, %v11701
  %v11703 = vpop.f32.mrf.mxu0
  %11704 = vmatprep.mubr.f32.mxu0 0.0
  %11705 = vmatmul.mubr.f32.gmra.mxu0 %v11363
  %v11706 = vpop.f32.mrf.mxu0
  %v11707 = vadd.f32 0.0, %v11706
  %v11708 = vpop.f32.mrf.mxu0
  %11709 = vmatprep.mubr.f32.mxu0 0.0
  %11710 = vmatmul.mubr.f32.gmra.mxu0 %v11366
  %v11711 = vpop.f32.mrf.mxu0
  %v11712 = vadd.f32 0.0, %v11711
  %v11713 = vpop.f32.mrf.mxu0
  %11714 = vmatprep.mubr.f32.mxu0 0.0
  %11715 = vmatmul.mubr.f32.gmra.mxu0 %v11369
  %v11716 = vpop.f32.mrf.mxu0
  %v11717 = vadd.f32 0.0, %v11716
  %v11718 = vpop.f32.mrf.mxu0
  %11719 = vmatprep.mubr.f32.mxu0 0.0
  %11720 = vmatmul.mubr.f32.gmra.mxu0 %v11372
  %v11721 = vpop.f32.mrf.mxu0
  %v11722 = vadd.f32 0.0, %v11721
  %v11723 = vpop.f32.mrf.mxu0
  %11724 = vmatprep.mubr.f32.mxu0 0.0
  %11725 = vmatmul.mubr.f32.gmra.mxu0 %v11375
  %v11726 = vpop.f32.mrf.mxu0
  %v11727 = vadd.f32 0.0, %v11726
  %v11728 = vpop.f32.mrf.mxu0
  %11729 = vmatprep.mubr.f32.mxu0 0.0
  %11730 = vmatmul.mubr.f32.gmra.mxu0 %v11378
  %v11731 = vpop.f32.mrf.mxu0
  %v11732 = vadd.f32 0.0, %v11731
  %v11733 = vpop.f32.mrf.mxu0
  %11734 = vmatprep.mubr.f32.mxu0 0.0
  %11735 = vmatmul.mubr.f32.gmra.mxu0 %v11381
  %v11736 = vpop.f32.mrf.mxu0
  %v11737 = vadd.f32 0.0, %v11736
  %v11738 = vpop.f32.mrf.mxu0
  %11739 = vmatprep.mubr.f32.mxu0 0.0
  %11740 = vmatmul.mubr.f32.gmra.mxu0 %v11384
  %v11741 = vpop.f32.mrf.mxu0
  %v11742 = vadd.f32 0.0, %v11741
  %v11743 = vpop.f32.mrf.mxu0
  %11744 = vmatprep.mubr.f32.mxu0 0.0
  %11745 = vmatmul.mubr.f32.gmra.mxu0 %v11387
  %v11746 = vpop.f32.mrf.mxu0
  %v11747 = vadd.f32 0.0, %v11746
  %v11748 = vpop.f32.mrf.mxu0
  %11749 = vmatprep.mubr.f32.mxu0 0.0
  %11750 = vmatmul.mubr.f32.gmra.mxu0 %v11390
  %v11751 = vpop.f32.mrf.mxu0
  %v11752 = vadd.f32 0.0, %v11751
  %v11753 = vpop.f32.mrf.mxu0
  %11754 = vmatprep.mubr.f32.mxu0 0.0
  %11755 = vmatmul.mubr.f32.gmra.mxu0 %v11393
  %v11756 = vpop.f32.mrf.mxu0
  %v11757 = vadd.f32 0.0, %v11756
  %v11758 = vpop.f32.mrf.mxu0
  %11759 = vmatprep.mubr.f32.mxu0 0.0
  %11760 = vmatmul.mubr.f32.gmra.mxu0 %v11396
  %v11761 = vpop.f32.mrf.mxu0
  %v11762 = vadd.f32 0.0, %v11761
  %v11763 = vpop.f32.mrf.mxu0
  %11764 = vmatprep.mubr.f32.mxu0 0.0
  %11765 = vmatmul.mubr.f32.gmra.mxu0 %v11399
  %v11766 = vpop.f32.mrf.mxu0
  %v11767 = vadd.f32 0.0, %v11766
  %v11768 = vpop.f32.mrf.mxu0
  %11769 = vmatprep.mubr.f32.mxu0 0.0
  %11770 = vmatmul.mubr.f32.gmra.mxu0 %v11402
  %v11771 = vpop.f32.mrf.mxu0
  %v11772 = vadd.f32 0.0, %v11771
  %v11773 = vpop.f32.mrf.mxu0
  %11774 = vmatprep.mubr.f32.mxu0 0.0
  %11775 = vmatmul.mubr.f32.gmra.mxu0 %v11405
  %v11776 = vpop.f32.mrf.mxu0
  %v11777 = vadd.f32 0.0, %v11776
  %v11778 = vpop.f32.mrf.mxu0
  %11779 = vmatprep.mubr.f32.mxu0 0.0
  %11780 = vmatmul.mubr.f32.gmra.mxu0 %v11408
  %v11781 = vpop.f32.mrf.mxu0
  %v11782 = vadd.f32 0.0, %v11781
  %v11783 = vpop.f32.mrf.mxu0
  %11784 = vmatprep.mubr.f32.mxu0 0.0
  %11785 = vmatmul.mubr.f32.gmra.mxu0 %v11411
  %v11786 = vpop.f32.mrf.mxu0
  %v11787 = vadd.f32 0.0, %v11786
  %v11788 = vpop.f32.mrf.mxu0
  %11789 = vmatprep.mubr.f32.mxu0 0.0
  %11790 = vmatmul.mubr.f32.gmra.mxu0 %v11414
  %v11791 = vpop.f32.mrf.mxu0
  %v11792 = vadd.f32 0.0, %v11791
  %v11793 = vpop.f32.mrf.mxu0
  %11794 = vmatprep.mubr.f32.mxu0 0.0
  %11795 = vmatmul.mubr.f32.gmra.mxu0 %v11417
  %v11796 = vpop.f32.mrf.mxu0
  %v11797 = vadd.f32 0.0, %v11796
  %v11798 = vpop.f32.mrf.mxu0
  %11799 = vmatprep.mubr.f32.mxu0 0.0
  %11800 = vmatmul.mubr.f32.gmra.mxu0 %v11420
  %v11801 = vpop.f32.mrf.mxu0
  %v11802 = vadd.f32 0.0, %v11801
  %v11803 = vpop.f32.mrf.mxu0
  %11804 = vmatprep.mubr.f32.mxu0 0.0
  %11805 = vmatmul.mubr.f32.gmra.mxu0 %v11423
  %v11806 = vpop.f32.mrf.mxu0
  %v11807 = vadd.f32 0.0, %v11806
  %v11808 = vpop.f32.mrf.mxu0
  %11809 = vdwg.mxu0
  %v11810 = vadd.f32 %v11102, %v11492
  %v11811 = vadd.f32 %v11103, %v11497
  %v11812 = vadd.f32 %v11104, %v11502
  %v11813 = vadd.f32 %v11105, %v11507
  %v11814 = vadd.f32 %v11106, %v11512
  %v11815 = vadd.f32 %v11107, %v11517
  %v11816 = vadd.f32 %v11108, %v11522
  %v11817 = vadd.f32 %v11109, %v11527
  %v11818 = vadd.f32 %v11110, %v11532
  %v11819 = vadd.f32 %v11111, %v11537
  %v11820 = vadd.f32 %v11112, %v11542
  %v11821 = vadd.f32 %v11113, %v11547
  %v11822 = vadd.f32 %v11114, %v11552
  %v11823 = vadd.f32 %v11115, %v11557
  %v11824 = vadd.f32 %v11116, %v11562
  %v11825 = vadd.f32 %v11117, %v11567
  %v11826 = vadd.f32 %v11118, %v11572
  %v11827 = vadd.f32 %v11119, %v11577
  %v11828 = vadd.f32 %v11120, %v11582
  %v11829 = vadd.f32 %v11121, %v11587
  %v11830 = vadd.f32 %v11122, %v11592
  %v11831 = vadd.f32 %v11123, %v11597
  %v11832 = vadd.f32 %v11124, %v11602
  %v11833 = vadd.f32 %v11125, %v11607
  %v11834 = vadd.f32 %v11126, %v11612
  %v11835 = vadd.f32 %v11127, %v11617
  %v11836 = vadd.f32 %v11128, %v11622
  %v11837 = vadd.f32 %v11129, %v11627
  %v11838 = vadd.f32 %v11130, %v11632
  %v11839 = vadd.f32 %v11131, %v11637
  %v11840 = vadd.f32 %v11132, %v11642
  %v11841 = vadd.f32 %v11133, %v11647
  %v11842 = vadd.f32 %v11134, %v11652
  %v11843 = vadd.f32 %v11135, %v11657
  %v11844 = vadd.f32 %v11136, %v11662
  %v11845 = vadd.f32 %v11137, %v11667
  %v11846 = vadd.f32 %v11138, %v11672
  %v11847 = vadd.f32 %v11139, %v11677
  %v11848 = vadd.f32 %v11140, %v11682
  %v11849 = vadd.f32 %v11141, %v11687
  %v11850 = vadd.f32 %v11142, %v11692
  %v11851 = vadd.f32 %v11143, %v11697
  %v11852 = vadd.f32 %v11144, %v11702
  %v11853 = vadd.f32 %v11145, %v11707
  %v11854 = vadd.f32 %v11146, %v11712
  %v11855 = vadd.f32 %v11147, %v11717
  %v11856 = vadd.f32 %v11148, %v11722
  %v11857 = vadd.f32 %v11149, %v11727
  %v11858 = vadd.f32 %v11150, %v11732
  %v11859 = vadd.f32 %v11151, %v11737
  %v11860 = vadd.f32 %v11152, %v11742
  %v11861 = vadd.f32 %v11153, %v11747
  %v11862 = vadd.f32 %v11154, %v11752
  %v11863 = vadd.f32 %v11155, %v11757
  %v11864 = vadd.f32 %v11156, %v11762
  %v11865 = vadd.f32 %v11157, %v11767
  %v11866 = vadd.f32 %v11158, %v11772
  %v11867 = vadd.f32 %v11159, %v11777
  %v11868 = vadd.f32 %v11160, %v11782
  %v11869 = vadd.f32 %v11161, %v11787
  %v11870 = vadd.f32 %v11162, %v11792
  %v11871 = vadd.f32 %v11163, %v11797
  %v11872 = vadd.f32 %v11164, %v11802
  %v11873 = vadd.f32 %v11165, %v11807
  %v11874 = vld [vmem:[%s11166 + $0x1] sm:$0xff]
  %v11875 = vld [vmem:[%s11166 + $0x9] sm:$0xff]
  %v11876 = vld [vmem:[%s11166 + $0x19] sm:$0xff]
  %v11877 = vld [vmem:[%s11166 + $0x21] sm:$0xff]
  %v11878 = vld [vmem:[%s11166 + $0x31] sm:$0xff]
  %v11879 = vld [vmem:[%s11166 + $0x39] sm:$0xff]
  %v11880 = vld [vmem:[%s11166 + $0x49] sm:$0xff]
  %v11881 = vld [vmem:[%s11166 + $0x51] sm:$0xff]
  %v11882 = vld [vmem:[%s11166 + $0x61] sm:$0xff]
  %v11883 = vld [vmem:[%s11166 + $0x69] sm:$0xff]
  %v11884 = vld [vmem:[%s11166 + $0x79] sm:$0xff]
  %v11885 = vld [vmem:[%s11166 + $0x81] sm:$0xff]
  %v11886 = vld [vmem:[%s11166 + $0x91] sm:$0xff]
  %v11887 = vld [vmem:[%s11166 + $0x99] sm:$0xff]
  %v11888 = vld [vmem:[%s11166 + $0xa9] sm:$0xff]
  %v11889 = vld [vmem:[%s11166 + $0xb1] sm:$0xff]
  %v11890 = vld [vmem:[%s11166 + $0xc1] sm:$0xff]
  %v11891 = vld [vmem:[%s11166 + $0xc9] sm:$0xff]
  %v11892 = vld [vmem:[%s11166 + $0xd9] sm:$0xff]
  %v11893 = vld [vmem:[%s11166 + $0xe1] sm:$0xff]
  %v11894 = vld [vmem:[%s11166 + $0xf1] sm:$0xff]
  %v11895 = vld [vmem:[%s11166 + $0xf9] sm:$0xff]
  %v11896 = vld [vmem:[%s11166 + $0x109] sm:$0xff]
  %v11897 = vld [vmem:[%s11166 + $0x111] sm:$0xff]
  %v11898 = vld [vmem:[%s11166 + $0x121] sm:$0xff]
  %v11899 = vld [vmem:[%s11166 + $0x129] sm:$0xff]
  %v11900 = vld [vmem:[%s11166 + $0x139] sm:$0xff]
  %v11901 = vld [vmem:[%s11166 + $0x141] sm:$0xff]
  %v11902 = vld [vmem:[%s11166 + $0x151] sm:$0xff]
  %v11903 = vld [vmem:[%s11166 + $0x159] sm:$0xff]
  %v11904 = vld [vmem:[%s11166 + $0x169] sm:$0xff]
  %v11905 = vld [vmem:[%s11166 + $0x171] sm:$0xff]
  %v11906 = vld [vmem:[%s11166 + $0x1b1] sm:$0xff]
  %v11907 = vld [vmem:[%s11166 + $0x1b9] sm:$0xff]
  %v11908 = vld [vmem:[%s11166 + $0x1c9] sm:$0xff]
  %v11909 = vld [vmem:[%s11166 + $0x1d1] sm:$0xff]
  %v11910 = vld [vmem:[%s11166 + $0x1e1] sm:$0xff]
  %v11911 = vld [vmem:[%s11166 + $0x1e9] sm:$0xff]
  %v11912 = vld [vmem:[%s11166 + $0x1f9] sm:$0xff]
  %v11913 = vld [vmem:[%s11166 + $0x201] sm:$0xff]
  %v11914 = vld [vmem:[%s11166 + $0x211] sm:$0xff]
  %v11915 = vld [vmem:[%s11166 + $0x219] sm:$0xff]
  %v11916 = vld [vmem:[%s11166 + $0x229] sm:$0xff]
  %v11917 = vld [vmem:[%s11166 + $0x231] sm:$0xff]
  %v11918 = vld [vmem:[%s11166 + $0x241] sm:$0xff]
  %v11919 = vld [vmem:[%s11166 + $0x249] sm:$0xff]
  %v11920 = vld [vmem:[%s11166 + $0x259] sm:$0xff]
  %v11921 = vld [vmem:[%s11166 + $0x261] sm:$0xff]
  %v11922 = vld [vmem:[%s11166 + $0x271] sm:$0xff]
  %v11923 = vld [vmem:[%s11166 + $0x279] sm:$0xff]
  %v11924 = vld [vmem:[%s11166 + $0x289] sm:$0xff]
  %v11925 = vld [vmem:[%s11166 + $0x291] sm:$0xff]
  %v11926 = vld [vmem:[%s11166 + $0x2a1] sm:$0xff]
  %v11927 = vld [vmem:[%s11166 + $0x2a9] sm:$0xff]
  %v11928 = vld [vmem:[%s11166 + $0x2b9] sm:$0xff]
  %v11929 = vld [vmem:[%s11166 + $0x2c1] sm:$0xff]
  %v11930 = vld [vmem:[%s11166 + $0x2d1] sm:$0xff]
  %v11931 = vld [vmem:[%s11166 + $0x2d9] sm:$0xff]
  %v11932 = vld [vmem:[%s11166 + $0x2e9] sm:$0xff]
  %v11933 = vld [vmem:[%s11166 + $0x2f1] sm:$0xff]
  %v11934 = vld [vmem:[%s11166 + $0x301] sm:$0xff]
  %v11935 = vld [vmem:[%s11166 + $0x309] sm:$0xff]
  %v11936 = vld [vmem:[%s11166 + $0x319] sm:$0xff]
  %v11937 = vld [vmem:[%s11166 + $0x321] sm:$0xff]
  %s11938 = scalar_lea.vmem %s2, 56
  %v11939 = vld [vmem:[%s11938] sm:$0xff]
  %v11941 = vsel %vm6360, %v11874, 0
  %v11944 = vsel %vm6360, %v11875, 0
  %v11947 = vsel %vm6360, %v11876, 0
  %v11950 = vsel %vm6360, %v11877, 0
  %v11953 = vsel %vm6360, %v11878, 0
  %v11956 = vsel %vm6360, %v11879, 0
  %v11959 = vsel %vm6360, %v11880, 0
  %v11962 = vsel %vm6360, %v11881, 0
  %v11965 = vsel %vm6360, %v11882, 0
  %v11968 = vsel %vm6360, %v11883, 0
  %v11971 = vsel %vm6360, %v11884, 0
  %v11974 = vsel %vm6360, %v11885, 0
  %v11977 = vsel %vm6360, %v11886, 0
  %v11980 = vsel %vm6360, %v11887, 0
  %v11983 = vsel %vm6360, %v11888, 0
  %v11986 = vsel %vm6360, %v11889, 0
  %v11989 = vsel %vm6360, %v11890, 0
  %v11992 = vsel %vm6360, %v11891, 0
  %v11995 = vsel %vm6360, %v11892, 0
  %v11998 = vsel %vm6360, %v11893, 0
  %v12001 = vsel %vm6360, %v11894, 0
  %v12004 = vsel %vm6360, %v11895, 0
  %v12007 = vsel %vm6360, %v11896, 0
  %v12010 = vsel %vm6360, %v11897, 0
  %v12013 = vsel %vm6360, %v11898, 0
  %v12016 = vsel %vm6360, %v11899, 0
  %v12019 = vsel %vm6360, %v11900, 0
  %v12022 = vsel %vm6360, %v11901, 0
  %v12025 = vsel %vm6360, %v11902, 0
  %v12028 = vsel %vm6360, %v11903, 0
  %v12031 = vsel %vm6360, %v11904, 0
  %v12034 = vsel %vm6360, %v11905, 0
  %v12037 = vsel %vm6360, %v11906, 0
  %v12040 = vsel %vm6360, %v11907, 0
  %v12043 = vsel %vm6360, %v11908, 0
  %v12046 = vsel %vm6360, %v11909, 0
  %v12049 = vsel %vm6360, %v11910, 0
  %v12052 = vsel %vm6360, %v11911, 0
  %v12055 = vsel %vm6360, %v11912, 0
  %v12058 = vsel %vm6360, %v11913, 0
  %v12061 = vsel %vm6360, %v11914, 0
  %v12064 = vsel %vm6360, %v11915, 0
  %v12067 = vsel %vm6360, %v11916, 0
  %v12070 = vsel %vm6360, %v11917, 0
  %v12073 = vsel %vm6360, %v11918, 0
  %v12076 = vsel %vm6360, %v11919, 0
  %v12079 = vsel %vm6360, %v11920, 0
  %v12082 = vsel %vm6360, %v11921, 0
  %v12085 = vsel %vm6360, %v11922, 0
  %v12088 = vsel %vm6360, %v11923, 0
  %v12091 = vsel %vm6360, %v11924, 0
  %v12094 = vsel %vm6360, %v11925, 0
  %v12097 = vsel %vm6360, %v11926, 0
  %v12100 = vsel %vm6360, %v11927, 0
  %v12103 = vsel %vm6360, %v11928, 0
  %v12106 = vsel %vm6360, %v11929, 0
  %v12109 = vsel %vm6360, %v11930, 0
  %v12112 = vsel %vm6360, %v11931, 0
  %v12115 = vsel %vm6360, %v11932, 0
  %v12118 = vsel %vm6360, %v11933, 0
  %v12121 = vsel %vm6360, %v11934, 0
  %v12124 = vsel %vm6360, %v11935, 0
  %v12127 = vsel %vm6360, %v11936, 0
  %v12130 = vsel %vm6360, %v11937, 0
  %12132 = vmatprep.subr.mxu0 0.0
  %12133 = vmatpush1.msra.mxu0 0.0
  %12134 = vmatprep.subr.mxu0 0.0
  %12135 = vmatpush1.msra.mxu0 0.0
  %12136 = vmatprep.subr.mxu0 0.0
  %12137 = vmatpush1.msra.mxu0 0.0
  %12138 = vmatprep.subr.mxu0 0.0
  %12139 = vmatpush1.msra.mxu0 0.0
  %12140 = vmatprep.subr.mxu0 0.0
  %12141 = vmatpush1.msra.mxu0 0.0
  %12142 = vmatprep.subr.mxu0 0.0
  %12143 = vmatpush1.msra.mxu0 0.0
  %12144 = vmatprep.subr.mxu0 0.0
  %12145 = vmatpush1.msra.mxu0 0.0
  %12146 = vmatprep.subr.mxu0 0.0
  %12147 = vmatpush1.msra.mxu0 0.0
  %12148 = vmatprep.subr.mxu0 0.0
  %12149 = vmatpush1.msra.mxu0 0.0
  %12150 = vmatprep.subr.mxu0 0.0
  %12151 = vmatpush1.msra.mxu0 0.0
  %12152 = vmatprep.subr.mxu0 0.0
  %12153 = vmatpush1.msra.mxu0 0.0
  %12154 = vmatprep.subr.mxu0 0.0
  %12155 = vmatpush1.msra.mxu0 0.0
  %12156 = vmatprep.subr.mxu0 0.0
  %12157 = vmatpush1.msra.mxu0 0.0
  %12158 = vmatprep.subr.mxu0 0.0
  %12159 = vmatpush1.msra.mxu0 0.0
  %12160 = vmatprep.subr.mxu0 0.0
  %12161 = vmatpush1.msra.mxu0 0.0
  %12162 = vmatprep.subr.mxu0 0.0
  %12163 = vmatpush1.msra.mxu0 %v11939
  %12164 = vmatprep.subr.mxu0 0.0
  %12165 = vmatpush2.msra.mxu0 0.0
  %12166 = vmatprep.subr.mxu0 0.0
  %12167 = vmatpush2.msra.mxu0 0.0
  %12168 = vmatprep.subr.mxu0 0.0
  %12169 = vmatpush2.msra.mxu0 0.0
  %12170 = vmatprep.subr.mxu0 0.0
  %12171 = vmatpush2.msra.mxu0 0.0
  %12172 = vmatprep.subr.mxu0 0.0
  %12173 = vmatpush2.msra.mxu0 0.0
  %12174 = vmatprep.subr.mxu0 0.0
  %12175 = vmatpush2.msra.mxu0 0.0
  %12176 = vmatprep.subr.mxu0 0.0
  %12177 = vmatpush2.msra.mxu0 0.0
  %12178 = vmatprep.subr.mxu0 0.0
  %12179 = vmatpush2.msra.mxu0 0.0
  %12180 = vmatprep.subr.mxu0 0.0
  %12181 = vmatpush2.msra.mxu0 0.0
  %12182 = vmatprep.subr.mxu0 0.0
  %12183 = vmatpush2.msra.mxu0 0.0
  %12184 = vmatprep.subr.mxu0 0.0
  %12185 = vmatpush2.msra.mxu0 0.0
  %12186 = vmatprep.subr.mxu0 0.0
  %12187 = vmatpush2.msra.mxu0 0.0
  %12188 = vmatprep.subr.mxu0 0.0
  %12189 = vmatpush2.msra.mxu0 0.0
  %12190 = vmatprep.subr.mxu0 0.0
  %12191 = vmatpush2.msra.mxu0 0.0
  %12192 = vmatprep.subr.mxu0 0.0
  %12193 = vmatpush2.msra.mxu0 0.0
  %12194 = vmatprep.subr.mxu0 0.0
  %12195 = vmatpush2.msra.mxu0 0.0
  %12196 = vmatprep.mubr.f32.mxu0 0.0
  %12197 = vmatmul.mubr.f32.gmra.mxu0 %v11941
  %v12198 = vpop.f32.mrf.mxu0
  %v12199 = vadd.f32 0.0, %v12198
  %v12200 = vpop.f32.mrf.mxu0
  %12201 = vmatprep.mubr.f32.mxu0 0.0
  %12202 = vmatmul.mubr.f32.gmra.mxu0 %v11944
  %v12203 = vpop.f32.mrf.mxu0
  %v12204 = vadd.f32 0.0, %v12203
  %v12205 = vpop.f32.mrf.mxu0
  %12206 = vmatprep.mubr.f32.mxu0 0.0
  %12207 = vmatmul.mubr.f32.gmra.mxu0 %v11947
  %v12208 = vpop.f32.mrf.mxu0
  %v12209 = vadd.f32 0.0, %v12208
  %v12210 = vpop.f32.mrf.mxu0
  %12211 = vmatprep.mubr.f32.mxu0 0.0
  %12212 = vmatmul.mubr.f32.gmra.mxu0 %v11950
  %v12213 = vpop.f32.mrf.mxu0
  %v12214 = vadd.f32 0.0, %v12213
  %v12215 = vpop.f32.mrf.mxu0
  %12216 = vmatprep.mubr.f32.mxu0 0.0
  %12217 = vmatmul.mubr.f32.gmra.mxu0 %v11953
  %v12218 = vpop.f32.mrf.mxu0
  %v12219 = vadd.f32 0.0, %v12218
  %v12220 = vpop.f32.mrf.mxu0
  %12221 = vmatprep.mubr.f32.mxu0 0.0
  %12222 = vmatmul.mubr.f32.gmra.mxu0 %v11956
  %v12223 = vpop.f32.mrf.mxu0
  %v12224 = vadd.f32 0.0, %v12223
  %v12225 = vpop.f32.mrf.mxu0
  %12226 = vmatprep.mubr.f32.mxu0 0.0
  %12227 = vmatmul.mubr.f32.gmra.mxu0 %v11959
  %v12228 = vpop.f32.mrf.mxu0
  %v12229 = vadd.f32 0.0, %v12228
  %v12230 = vpop.f32.mrf.mxu0
  %12231 = vmatprep.mubr.f32.mxu0 0.0
  %12232 = vmatmul.mubr.f32.gmra.mxu0 %v11962
  %v12233 = vpop.f32.mrf.mxu0
  %v12234 = vadd.f32 0.0, %v12233
  %v12235 = vpop.f32.mrf.mxu0
  %12236 = vmatprep.mubr.f32.mxu0 0.0
  %12237 = vmatmul.mubr.f32.gmra.mxu0 %v11965
  %v12238 = vpop.f32.mrf.mxu0
  %v12239 = vadd.f32 0.0, %v12238
  %v12240 = vpop.f32.mrf.mxu0
  %12241 = vmatprep.mubr.f32.mxu0 0.0
  %12242 = vmatmul.mubr.f32.gmra.mxu0 %v11968
  %v12243 = vpop.f32.mrf.mxu0
  %v12244 = vadd.f32 0.0, %v12243
  %v12245 = vpop.f32.mrf.mxu0
  %12246 = vmatprep.mubr.f32.mxu0 0.0
  %12247 = vmatmul.mubr.f32.gmra.mxu0 %v11971
  %v12248 = vpop.f32.mrf.mxu0
  %v12249 = vadd.f32 0.0, %v12248
  %v12250 = vpop.f32.mrf.mxu0
  %12251 = vmatprep.mubr.f32.mxu0 0.0
  %12252 = vmatmul.mubr.f32.gmra.mxu0 %v11974
  %v12253 = vpop.f32.mrf.mxu0
  %v12254 = vadd.f32 0.0, %v12253
  %v12255 = vpop.f32.mrf.mxu0
  %12256 = vmatprep.mubr.f32.mxu0 0.0
  %12257 = vmatmul.mubr.f32.gmra.mxu0 %v11977
  %v12258 = vpop.f32.mrf.mxu0
  %v12259 = vadd.f32 0.0, %v12258
  %v12260 = vpop.f32.mrf.mxu0
  %12261 = vmatprep.mubr.f32.mxu0 0.0
  %12262 = vmatmul.mubr.f32.gmra.mxu0 %v11980
  %v12263 = vpop.f32.mrf.mxu0
  %v12264 = vadd.f32 0.0, %v12263
  %v12265 = vpop.f32.mrf.mxu0
  %12266 = vmatprep.mubr.f32.mxu0 0.0
  %12267 = vmatmul.mubr.f32.gmra.mxu0 %v11983
  %v12268 = vpop.f32.mrf.mxu0
  %v12269 = vadd.f32 0.0, %v12268
  %v12270 = vpop.f32.mrf.mxu0
  %12271 = vmatprep.mubr.f32.mxu0 0.0
  %12272 = vmatmul.mubr.f32.gmra.mxu0 %v11986
  %v12273 = vpop.f32.mrf.mxu0
  %v12274 = vadd.f32 0.0, %v12273
  %v12275 = vpop.f32.mrf.mxu0
  %12276 = vmatprep.mubr.f32.mxu0 0.0
  %12277 = vmatmul.mubr.f32.gmra.mxu0 %v11989
  %v12278 = vpop.f32.mrf.mxu0
  %v12279 = vadd.f32 0.0, %v12278
  %v12280 = vpop.f32.mrf.mxu0
  %12281 = vmatprep.mubr.f32.mxu0 0.0
  %12282 = vmatmul.mubr.f32.gmra.mxu0 %v11992
  %v12283 = vpop.f32.mrf.mxu0
  %v12284 = vadd.f32 0.0, %v12283
  %v12285 = vpop.f32.mrf.mxu0
  %12286 = vmatprep.mubr.f32.mxu0 0.0
  %12287 = vmatmul.mubr.f32.gmra.mxu0 %v11995
  %v12288 = vpop.f32.mrf.mxu0
  %v12289 = vadd.f32 0.0, %v12288
  %v12290 = vpop.f32.mrf.mxu0
  %12291 = vmatprep.mubr.f32.mxu0 0.0
  %12292 = vmatmul.mubr.f32.gmra.mxu0 %v11998
  %v12293 = vpop.f32.mrf.mxu0
  %v12294 = vadd.f32 0.0, %v12293
  %v12295 = vpop.f32.mrf.mxu0
  %12296 = vmatprep.mubr.f32.mxu0 0.0
  %12297 = vmatmul.mubr.f32.gmra.mxu0 %v12001
  %v12298 = vpop.f32.mrf.mxu0
  %v12299 = vadd.f32 0.0, %v12298
  %v12300 = vpop.f32.mrf.mxu0
  %12301 = vmatprep.mubr.f32.mxu0 0.0
  %12302 = vmatmul.mubr.f32.gmra.mxu0 %v12004
  %v12303 = vpop.f32.mrf.mxu0
  %v12304 = vadd.f32 0.0, %v12303
  %v12305 = vpop.f32.mrf.mxu0
  %12306 = vmatprep.mubr.f32.mxu0 0.0
  %12307 = vmatmul.mubr.f32.gmra.mxu0 %v12007
  %v12308 = vpop.f32.mrf.mxu0
  %v12309 = vadd.f32 0.0, %v12308
  %v12310 = vpop.f32.mrf.mxu0
  %12311 = vmatprep.mubr.f32.mxu0 0.0
  %12312 = vmatmul.mubr.f32.gmra.mxu0 %v12010
  %v12313 = vpop.f32.mrf.mxu0
  %v12314 = vadd.f32 0.0, %v12313
  %v12315 = vpop.f32.mrf.mxu0
  %12316 = vmatprep.mubr.f32.mxu0 0.0
  %12317 = vmatmul.mubr.f32.gmra.mxu0 %v12013
  %v12318 = vpop.f32.mrf.mxu0
  %v12319 = vadd.f32 0.0, %v12318
  %v12320 = vpop.f32.mrf.mxu0
  %12321 = vmatprep.mubr.f32.mxu0 0.0
  %12322 = vmatmul.mubr.f32.gmra.mxu0 %v12016
  %v12323 = vpop.f32.mrf.mxu0
  %v12324 = vadd.f32 0.0, %v12323
  %v12325 = vpop.f32.mrf.mxu0
  %12326 = vmatprep.mubr.f32.mxu0 0.0
  %12327 = vmatmul.mubr.f32.gmra.mxu0 %v12019
  %v12328 = vpop.f32.mrf.mxu0
  %v12329 = vadd.f32 0.0, %v12328
  %v12330 = vpop.f32.mrf.mxu0
  %12331 = vmatprep.mubr.f32.mxu0 0.0
  %12332 = vmatmul.mubr.f32.gmra.mxu0 %v12022
  %v12333 = vpop.f32.mrf.mxu0
  %v12334 = vadd.f32 0.0, %v12333
  %v12335 = vpop.f32.mrf.mxu0
  %12336 = vmatprep.mubr.f32.mxu0 0.0
  %12337 = vmatmul.mubr.f32.gmra.mxu0 %v12025
  %v12338 = vpop.f32.mrf.mxu0
  %v12339 = vadd.f32 0.0, %v12338
  %v12340 = vpop.f32.mrf.mxu0
  %12341 = vmatprep.mubr.f32.mxu0 0.0
  %12342 = vmatmul.mubr.f32.gmra.mxu0 %v12028
  %v12343 = vpop.f32.mrf.mxu0
  %v12344 = vadd.f32 0.0, %v12343
  %v12345 = vpop.f32.mrf.mxu0
  %12346 = vmatprep.mubr.f32.mxu0 0.0
  %12347 = vmatmul.mubr.f32.gmra.mxu0 %v12031
  %v12348 = vpop.f32.mrf.mxu0
  %v12349 = vadd.f32 0.0, %v12348
  %v12350 = vpop.f32.mrf.mxu0
  %12351 = vmatprep.mubr.f32.mxu0 0.0
  %12352 = vmatmul.mubr.f32.gmra.mxu0 %v12034
  %v12353 = vpop.f32.mrf.mxu0
  %v12354 = vadd.f32 0.0, %v12353
  %v12355 = vpop.f32.mrf.mxu0
  %12356 = vmatprep.mubr.f32.mxu0 0.0
  %12357 = vmatmul.mubr.f32.gmra.mxu0 %v12037
  %v12358 = vpop.f32.mrf.mxu0
  %v12359 = vadd.f32 0.0, %v12358
  %v12360 = vpop.f32.mrf.mxu0
  %12361 = vmatprep.mubr.f32.mxu0 0.0
  %12362 = vmatmul.mubr.f32.gmra.mxu0 %v12040
  %v12363 = vpop.f32.mrf.mxu0
  %v12364 = vadd.f32 0.0, %v12363
  %v12365 = vpop.f32.mrf.mxu0
  %12366 = vmatprep.mubr.f32.mxu0 0.0
  %12367 = vmatmul.mubr.f32.gmra.mxu0 %v12043
  %v12368 = vpop.f32.mrf.mxu0
  %v12369 = vadd.f32 0.0, %v12368
  %v12370 = vpop.f32.mrf.mxu0
  %12371 = vmatprep.mubr.f32.mxu0 0.0
  %12372 = vmatmul.mubr.f32.gmra.mxu0 %v12046
  %v12373 = vpop.f32.mrf.mxu0
  %v12374 = vadd.f32 0.0, %v12373
  %v12375 = vpop.f32.mrf.mxu0
  %12376 = vmatprep.mubr.f32.mxu0 0.0
  %12377 = vmatmul.mubr.f32.gmra.mxu0 %v12049
  %v12378 = vpop.f32.mrf.mxu0
  %v12379 = vadd.f32 0.0, %v12378
  %v12380 = vpop.f32.mrf.mxu0
  %12381 = vmatprep.mubr.f32.mxu0 0.0
  %12382 = vmatmul.mubr.f32.gmra.mxu0 %v12052
  %v12383 = vpop.f32.mrf.mxu0
  %v12384 = vadd.f32 0.0, %v12383
  %v12385 = vpop.f32.mrf.mxu0
  %12386 = vmatprep.mubr.f32.mxu0 0.0
  %12387 = vmatmul.mubr.f32.gmra.mxu0 %v12055
  %v12388 = vpop.f32.mrf.mxu0
  %v12389 = vadd.f32 0.0, %v12388
  %v12390 = vpop.f32.mrf.mxu0
  %12391 = vmatprep.mubr.f32.mxu0 0.0
  %12392 = vmatmul.mubr.f32.gmra.mxu0 %v12058
  %v12393 = vpop.f32.mrf.mxu0
  %v12394 = vadd.f32 0.0, %v12393
  %v12395 = vpop.f32.mrf.mxu0
  %12396 = vmatprep.mubr.f32.mxu0 0.0
  %12397 = vmatmul.mubr.f32.gmra.mxu0 %v12061
  %v12398 = vpop.f32.mrf.mxu0
  %v12399 = vadd.f32 0.0, %v12398
  %v12400 = vpop.f32.mrf.mxu0
  %12401 = vmatprep.mubr.f32.mxu0 0.0
  %12402 = vmatmul.mubr.f32.gmra.mxu0 %v12064
  %v12403 = vpop.f32.mrf.mxu0
  %v12404 = vadd.f32 0.0, %v12403
  %v12405 = vpop.f32.mrf.mxu0
  %12406 = vmatprep.mubr.f32.mxu0 0.0
  %12407 = vmatmul.mubr.f32.gmra.mxu0 %v12067
  %v12408 = vpop.f32.mrf.mxu0
  %v12409 = vadd.f32 0.0, %v12408
  %v12410 = vpop.f32.mrf.mxu0
  %12411 = vmatprep.mubr.f32.mxu0 0.0
  %12412 = vmatmul.mubr.f32.gmra.mxu0 %v12070
  %v12413 = vpop.f32.mrf.mxu0
  %v12414 = vadd.f32 0.0, %v12413
  %v12415 = vpop.f32.mrf.mxu0
  %12416 = vmatprep.mubr.f32.mxu0 0.0
  %12417 = vmatmul.mubr.f32.gmra.mxu0 %v12073
  %v12418 = vpop.f32.mrf.mxu0
  %v12419 = vadd.f32 0.0, %v12418
  %v12420 = vpop.f32.mrf.mxu0
  %12421 = vmatprep.mubr.f32.mxu0 0.0
  %12422 = vmatmul.mubr.f32.gmra.mxu0 %v12076
  %v12423 = vpop.f32.mrf.mxu0
  %v12424 = vadd.f32 0.0, %v12423
  %v12425 = vpop.f32.mrf.mxu0
  %12426 = vmatprep.mubr.f32.mxu0 0.0
  %12427 = vmatmul.mubr.f32.gmra.mxu0 %v12079
  %v12428 = vpop.f32.mrf.mxu0
  %v12429 = vadd.f32 0.0, %v12428
  %v12430 = vpop.f32.mrf.mxu0
  %12431 = vmatprep.mubr.f32.mxu0 0.0
  %12432 = vmatmul.mubr.f32.gmra.mxu0 %v12082
  %v12433 = vpop.f32.mrf.mxu0
  %v12434 = vadd.f32 0.0, %v12433
  %v12435 = vpop.f32.mrf.mxu0
  %12436 = vmatprep.mubr.f32.mxu0 0.0
  %12437 = vmatmul.mubr.f32.gmra.mxu0 %v12085
  %v12438 = vpop.f32.mrf.mxu0
  %v12439 = vadd.f32 0.0, %v12438
  %v12440 = vpop.f32.mrf.mxu0
  %12441 = vmatprep.mubr.f32.mxu0 0.0
  %12442 = vmatmul.mubr.f32.gmra.mxu0 %v12088
  %v12443 = vpop.f32.mrf.mxu0
  %v12444 = vadd.f32 0.0, %v12443
  %v12445 = vpop.f32.mrf.mxu0
  %12446 = vmatprep.mubr.f32.mxu0 0.0
  %12447 = vmatmul.mubr.f32.gmra.mxu0 %v12091
  %v12448 = vpop.f32.mrf.mxu0
  %v12449 = vadd.f32 0.0, %v12448
  %v12450 = vpop.f32.mrf.mxu0
  %12451 = vmatprep.mubr.f32.mxu0 0.0
  %12452 = vmatmul.mubr.f32.gmra.mxu0 %v12094
  %v12453 = vpop.f32.mrf.mxu0
  %v12454 = vadd.f32 0.0, %v12453
  %v12455 = vpop.f32.mrf.mxu0
  %12456 = vmatprep.mubr.f32.mxu0 0.0
  %12457 = vmatmul.mubr.f32.gmra.mxu0 %v12097
  %v12458 = vpop.f32.mrf.mxu0
  %v12459 = vadd.f32 0.0, %v12458
  %v12460 = vpop.f32.mrf.mxu0
  %12461 = vmatprep.mubr.f32.mxu0 0.0
  %12462 = vmatmul.mubr.f32.gmra.mxu0 %v12100
  %v12463 = vpop.f32.mrf.mxu0
  %v12464 = vadd.f32 0.0, %v12463
  %v12465 = vpop.f32.mrf.mxu0
  %12466 = vmatprep.mubr.f32.mxu0 0.0
  %12467 = vmatmul.mubr.f32.gmra.mxu0 %v12103
  %v12468 = vpop.f32.mrf.mxu0
  %v12469 = vadd.f32 0.0, %v12468
  %v12470 = vpop.f32.mrf.mxu0
  %12471 = vmatprep.mubr.f32.mxu0 0.0
  %12472 = vmatmul.mubr.f32.gmra.mxu0 %v12106
  %v12473 = vpop.f32.mrf.mxu0
  %v12474 = vadd.f32 0.0, %v12473
  %v12475 = vpop.f32.mrf.mxu0
  %12476 = vmatprep.mubr.f32.mxu0 0.0
  %12477 = vmatmul.mubr.f32.gmra.mxu0 %v12109
  %v12478 = vpop.f32.mrf.mxu0
  %v12479 = vadd.f32 0.0, %v12478
  %v12480 = vpop.f32.mrf.mxu0
  %12481 = vmatprep.mubr.f32.mxu0 0.0
  %12482 = vmatmul.mubr.f32.gmra.mxu0 %v12112
  %v12483 = vpop.f32.mrf.mxu0
  %v12484 = vadd.f32 0.0, %v12483
  %v12485 = vpop.f32.mrf.mxu0
  %12486 = vmatprep.mubr.f32.mxu0 0.0
  %12487 = vmatmul.mubr.f32.gmra.mxu0 %v12115
  %v12488 = vpop.f32.mrf.mxu0
  %v12489 = vadd.f32 0.0, %v12488
  %v12490 = vpop.f32.mrf.mxu0
  %12491 = vmatprep.mubr.f32.mxu0 0.0
  %12492 = vmatmul.mubr.f32.gmra.mxu0 %v12118
  %v12493 = vpop.f32.mrf.mxu0
  %v12494 = vadd.f32 0.0, %v12493
  %v12495 = vpop.f32.mrf.mxu0
  %12496 = vmatprep.mubr.f32.mxu0 0.0
  %12497 = vmatmul.mubr.f32.gmra.mxu0 %v12121
  %v12498 = vpop.f32.mrf.mxu0
  %v12499 = vadd.f32 0.0, %v12498
  %v12500 = vpop.f32.mrf.mxu0
  %12501 = vmatprep.mubr.f32.mxu0 0.0
  %12502 = vmatmul.mubr.f32.gmra.mxu0 %v12124
  %v12503 = vpop.f32.mrf.mxu0
  %v12504 = vadd.f32 0.0, %v12503
  %v12505 = vpop.f32.mrf.mxu0
  %12506 = vmatprep.mubr.f32.mxu0 0.0
  %12507 = vmatmul.mubr.f32.gmra.mxu0 %v12127
  %v12508 = vpop.f32.mrf.mxu0
  %v12509 = vadd.f32 0.0, %v12508
  %v12510 = vpop.f32.mrf.mxu0
  %12511 = vmatprep.mubr.f32.mxu0 0.0
  %12512 = vmatmul.mubr.f32.gmra.mxu0 %v12130
  %v12513 = vpop.f32.mrf.mxu0
  %v12514 = vadd.f32 0.0, %v12513
  %v12515 = vpop.f32.mrf.mxu0
  %12516 = vdwg.mxu0
  %v12517 = vadd.f32 %v11810, %v12199
  %v12518 = vadd.f32 %v11811, %v12204
  %v12519 = vadd.f32 %v11812, %v12209
  %v12520 = vadd.f32 %v11813, %v12214
  %v12521 = vadd.f32 %v11814, %v12219
  %v12522 = vadd.f32 %v11815, %v12224
  %v12523 = vadd.f32 %v11816, %v12229
  %v12524 = vadd.f32 %v11817, %v12234
  %v12525 = vadd.f32 %v11818, %v12239
  %v12526 = vadd.f32 %v11819, %v12244
  %v12527 = vadd.f32 %v11820, %v12249
  %v12528 = vadd.f32 %v11821, %v12254
  %v12529 = vadd.f32 %v11822, %v12259
  %v12530 = vadd.f32 %v11823, %v12264
  %v12531 = vadd.f32 %v11824, %v12269
  %v12532 = vadd.f32 %v11825, %v12274
  %v12533 = vadd.f32 %v11826, %v12279
  %v12534 = vadd.f32 %v11827, %v12284
  %v12535 = vadd.f32 %v11828, %v12289
  %v12536 = vadd.f32 %v11829, %v12294
  %v12537 = vadd.f32 %v11830, %v12299
  %v12538 = vadd.f32 %v11831, %v12304
  %v12539 = vadd.f32 %v11832, %v12309
  %v12540 = vadd.f32 %v11833, %v12314
  %v12541 = vadd.f32 %v11834, %v12319
  %v12542 = vadd.f32 %v11835, %v12324
  %v12543 = vadd.f32 %v11836, %v12329
  %v12544 = vadd.f32 %v11837, %v12334
  %v12545 = vadd.f32 %v11838, %v12339
  %v12546 = vadd.f32 %v11839, %v12344
  %v12547 = vadd.f32 %v11840, %v12349
  %v12548 = vadd.f32 %v11841, %v12354
  %v12549 = vadd.f32 %v11842, %v12359
  %v12550 = vadd.f32 %v11843, %v12364
  %v12551 = vadd.f32 %v11844, %v12369
  %v12552 = vadd.f32 %v11845, %v12374
  %v12553 = vadd.f32 %v11846, %v12379
  %v12554 = vadd.f32 %v11847, %v12384
  %v12555 = vadd.f32 %v11848, %v12389
  %v12556 = vadd.f32 %v11849, %v12394
  %v12557 = vadd.f32 %v11850, %v12399
  %v12558 = vadd.f32 %v11851, %v12404
  %v12559 = vadd.f32 %v11852, %v12409
  %v12560 = vadd.f32 %v11853, %v12414
  %v12561 = vadd.f32 %v11854, %v12419
  %v12562 = vadd.f32 %v11855, %v12424
  %v12563 = vadd.f32 %v11856, %v12429
  %v12564 = vadd.f32 %v11857, %v12434
  %v12565 = vadd.f32 %v11858, %v12439
  %v12566 = vadd.f32 %v11859, %v12444
  %v12567 = vadd.f32 %v11860, %v12449
  %v12568 = vadd.f32 %v11861, %v12454
  %v12569 = vadd.f32 %v11862, %v12459
  %v12570 = vadd.f32 %v11863, %v12464
  %v12571 = vadd.f32 %v11864, %v12469
  %v12572 = vadd.f32 %v11865, %v12474
  %v12573 = vadd.f32 %v11866, %v12479
  %v12574 = vadd.f32 %v11867, %v12484
  %v12575 = vadd.f32 %v11868, %v12489
  %v12576 = vadd.f32 %v11869, %v12494
  %v12577 = vadd.f32 %v11870, %v12499
  %v12578 = vadd.f32 %v11871, %v12504
  %v12579 = vadd.f32 %v11872, %v12509
  %v12580 = vadd.f32 %v11873, %v12514
  %v12581 = vld [vmem:[%s11166 + $0x2] sm:$0xff]
  %v12582 = vld [vmem:[%s11166 + $0xa] sm:$0xff]
  %v12583 = vld [vmem:[%s11166 + $0x1a] sm:$0xff]
  %v12584 = vld [vmem:[%s11166 + $0x22] sm:$0xff]
  %v12585 = vld [vmem:[%s11166 + $0x32] sm:$0xff]
  %v12586 = vld [vmem:[%s11166 + $0x3a] sm:$0xff]
  %v12587 = vld [vmem:[%s11166 + $0x4a] sm:$0xff]
  %v12588 = vld [vmem:[%s11166 + $0x52] sm:$0xff]
  %v12589 = vld [vmem:[%s11166 + $0x62] sm:$0xff]
  %v12590 = vld [vmem:[%s11166 + $0x6a] sm:$0xff]
  %v12591 = vld [vmem:[%s11166 + $0x7a] sm:$0xff]
  %v12592 = vld [vmem:[%s11166 + $0x82] sm:$0xff]
  %v12593 = vld [vmem:[%s11166 + $0x92] sm:$0xff]
  %v12594 = vld [vmem:[%s11166 + $0x9a] sm:$0xff]
  %v12595 = vld [vmem:[%s11166 + $0xaa] sm:$0xff]
  %v12596 = vld [vmem:[%s11166 + $0xb2] sm:$0xff]
  %v12597 = vld [vmem:[%s11166 + $0xc2] sm:$0xff]
  %v12598 = vld [vmem:[%s11166 + $0xca] sm:$0xff]
  %v12599 = vld [vmem:[%s11166 + $0xda] sm:$0xff]
  %v12600 = vld [vmem:[%s11166 + $0xe2] sm:$0xff]
  %v12601 = vld [vmem:[%s11166 + $0xf2] sm:$0xff]
  %v12602 = vld [vmem:[%s11166 + $0xfa] sm:$0xff]
  %v12603 = vld [vmem:[%s11166 + $0x10a] sm:$0xff]
  %v12604 = vld [vmem:[%s11166 + $0x112] sm:$0xff]
  %v12605 = vld [vmem:[%s11166 + $0x122] sm:$0xff]
  %v12606 = vld [vmem:[%s11166 + $0x12a] sm:$0xff]
  %v12607 = vld [vmem:[%s11166 + $0x13a] sm:$0xff]
  %v12608 = vld [vmem:[%s11166 + $0x142] sm:$0xff]
  %v12609 = vld [vmem:[%s11166 + $0x152] sm:$0xff]
  %v12610 = vld [vmem:[%s11166 + $0x15a] sm:$0xff]
  %v12611 = vld [vmem:[%s11166 + $0x16a] sm:$0xff]
  %v12612 = vld [vmem:[%s11166 + $0x172] sm:$0xff]
  %v12613 = vld [vmem:[%s11166 + $0x1b2] sm:$0xff]
  %v12614 = vld [vmem:[%s11166 + $0x1ba] sm:$0xff]
  %v12615 = vld [vmem:[%s11166 + $0x1ca] sm:$0xff]
  %v12616 = vld [vmem:[%s11166 + $0x1d2] sm:$0xff]
  %v12617 = vld [vmem:[%s11166 + $0x1e2] sm:$0xff]
  %v12618 = vld [vmem:[%s11166 + $0x1ea] sm:$0xff]
  %v12619 = vld [vmem:[%s11166 + $0x1fa] sm:$0xff]
  %v12620 = vld [vmem:[%s11166 + $0x202] sm:$0xff]
  %v12621 = vld [vmem:[%s11166 + $0x212] sm:$0xff]
  %v12622 = vld [vmem:[%s11166 + $0x21a] sm:$0xff]
  %v12623 = vld [vmem:[%s11166 + $0x22a] sm:$0xff]
  %v12624 = vld [vmem:[%s11166 + $0x232] sm:$0xff]
  %v12625 = vld [vmem:[%s11166 + $0x242] sm:$0xff]
  %v12626 = vld [vmem:[%s11166 + $0x24a] sm:$0xff]
  %v12627 = vld [vmem:[%s11166 + $0x25a] sm:$0xff]
  %v12628 = vld [vmem:[%s11166 + $0x262] sm:$0xff]
  %v12629 = vld [vmem:[%s11166 + $0x272] sm:$0xff]
  %v12630 = vld [vmem:[%s11166 + $0x27a] sm:$0xff]
  %v12631 = vld [vmem:[%s11166 + $0x28a] sm:$0xff]
  %v12632 = vld [vmem:[%s11166 + $0x292] sm:$0xff]
  %v12633 = vld [vmem:[%s11166 + $0x2a2] sm:$0xff]
  %v12634 = vld [vmem:[%s11166 + $0x2aa] sm:$0xff]
  %v12635 = vld [vmem:[%s11166 + $0x2ba] sm:$0xff]
  %v12636 = vld [vmem:[%s11166 + $0x2c2] sm:$0xff]
  %v12637 = vld [vmem:[%s11166 + $0x2d2] sm:$0xff]
  %v12638 = vld [vmem:[%s11166 + $0x2da] sm:$0xff]
  %v12639 = vld [vmem:[%s11166 + $0x2ea] sm:$0xff]
  %v12640 = vld [vmem:[%s11166 + $0x2f2] sm:$0xff]
  %v12641 = vld [vmem:[%s11166 + $0x302] sm:$0xff]
  %v12642 = vld [vmem:[%s11166 + $0x30a] sm:$0xff]
  %v12643 = vld [vmem:[%s11166 + $0x31a] sm:$0xff]
  %v12644 = vld [vmem:[%s11166 + $0x322] sm:$0xff]
  %s12645 = scalar_lea.vmem %s2, 64
  %v12646 = vld [vmem:[%s12645] sm:$0xff]
  %v12648 = vsel %vm6360, %v12581, 0
  %v12651 = vsel %vm6360, %v12582, 0
  %v12654 = vsel %vm6360, %v12583, 0
  %v12657 = vsel %vm6360, %v12584, 0
  %v12660 = vsel %vm6360, %v12585, 0
  %v12663 = vsel %vm6360, %v12586, 0
  %v12666 = vsel %vm6360, %v12587, 0
  %v12669 = vsel %vm6360, %v12588, 0
  %v12672 = vsel %vm6360, %v12589, 0
  %v12675 = vsel %vm6360, %v12590, 0
  %v12678 = vsel %vm6360, %v12591, 0
  %v12681 = vsel %vm6360, %v12592, 0
  %v12684 = vsel %vm6360, %v12593, 0
  %v12687 = vsel %vm6360, %v12594, 0
  %v12690 = vsel %vm6360, %v12595, 0
  %v12693 = vsel %vm6360, %v12596, 0
  %v12696 = vsel %vm6360, %v12597, 0
  %v12699 = vsel %vm6360, %v12598, 0
  %v12702 = vsel %vm6360, %v12599, 0
  %v12705 = vsel %vm6360, %v12600, 0
  %v12708 = vsel %vm6360, %v12601, 0
  %v12711 = vsel %vm6360, %v12602, 0
  %v12714 = vsel %vm6360, %v12603, 0
  %v12717 = vsel %vm6360, %v12604, 0
  %v12720 = vsel %vm6360, %v12605, 0
  %v12723 = vsel %vm6360, %v12606, 0
  %v12726 = vsel %vm6360, %v12607, 0
  %v12729 = vsel %vm6360, %v12608, 0
  %v12732 = vsel %vm6360, %v12609, 0
  %v12735 = vsel %vm6360, %v12610, 0
  %v12738 = vsel %vm6360, %v12611, 0
  %v12741 = vsel %vm6360, %v12612, 0
  %v12744 = vsel %vm6360, %v12613, 0
  %v12747 = vsel %vm6360, %v12614, 0
  %v12750 = vsel %vm6360, %v12615, 0
  %v12753 = vsel %vm6360, %v12616, 0
  %v12756 = vsel %vm6360, %v12617, 0
  %v12759 = vsel %vm6360, %v12618, 0
  %v12762 = vsel %vm6360, %v12619, 0
  %v12765 = vsel %vm6360, %v12620, 0
  %v12768 = vsel %vm6360, %v12621, 0
  %v12771 = vsel %vm6360, %v12622, 0
  %v12774 = vsel %vm6360, %v12623, 0
  %v12777 = vsel %vm6360, %v12624, 0
  %v12780 = vsel %vm6360, %v12625, 0
  %v12783 = vsel %vm6360, %v12626, 0
  %v12786 = vsel %vm6360, %v12627, 0
  %v12789 = vsel %vm6360, %v12628, 0
  %v12792 = vsel %vm6360, %v12629, 0
  %v12795 = vsel %vm6360, %v12630, 0
  %v12798 = vsel %vm6360, %v12631, 0
  %v12801 = vsel %vm6360, %v12632, 0
  %v12804 = vsel %vm6360, %v12633, 0
  %v12807 = vsel %vm6360, %v12634, 0
  %v12810 = vsel %vm6360, %v12635, 0
  %v12813 = vsel %vm6360, %v12636, 0
  %v12816 = vsel %vm6360, %v12637, 0
  %v12819 = vsel %vm6360, %v12638, 0
  %v12822 = vsel %vm6360, %v12639, 0
  %v12825 = vsel %vm6360, %v12640, 0
  %v12828 = vsel %vm6360, %v12641, 0
  %v12831 = vsel %vm6360, %v12642, 0
  %v12834 = vsel %vm6360, %v12643, 0
  %v12837 = vsel %vm6360, %v12644, 0
  %12839 = vmatprep.subr.mxu0 0.0
  %12840 = vmatpush1.msra.mxu0 0.0
  %12841 = vmatprep.subr.mxu0 0.0
  %12842 = vmatpush1.msra.mxu0 0.0
  %12843 = vmatprep.subr.mxu0 0.0
  %12844 = vmatpush1.msra.mxu0 0.0
  %12845 = vmatprep.subr.mxu0 0.0
  %12846 = vmatpush1.msra.mxu0 0.0
  %12847 = vmatprep.subr.mxu0 0.0
  %12848 = vmatpush1.msra.mxu0 0.0
  %12849 = vmatprep.subr.mxu0 0.0
  %12850 = vmatpush1.msra.mxu0 0.0
  %12851 = vmatprep.subr.mxu0 0.0
  %12852 = vmatpush1.msra.mxu0 0.0
  %12853 = vmatprep.subr.mxu0 0.0
  %12854 = vmatpush1.msra.mxu0 0.0
  %12855 = vmatprep.subr.mxu0 0.0
  %12856 = vmatpush1.msra.mxu0 0.0
  %12857 = vmatprep.subr.mxu0 0.0
  %12858 = vmatpush1.msra.mxu0 0.0
  %12859 = vmatprep.subr.mxu0 0.0
  %12860 = vmatpush1.msra.mxu0 0.0
  %12861 = vmatprep.subr.mxu0 0.0
  %12862 = vmatpush1.msra.mxu0 0.0
  %12863 = vmatprep.subr.mxu0 0.0
  %12864 = vmatpush1.msra.mxu0 0.0
  %12865 = vmatprep.subr.mxu0 0.0
  %12866 = vmatpush1.msra.mxu0 0.0
  %12867 = vmatprep.subr.mxu0 0.0
  %12868 = vmatpush1.msra.mxu0 0.0
  %12869 = vmatprep.subr.mxu0 0.0
  %12870 = vmatpush1.msra.mxu0 %v12646
  %12871 = vmatprep.subr.mxu0 0.0
  %12872 = vmatpush2.msra.mxu0 0.0
  %12873 = vmatprep.subr.mxu0 0.0
  %12874 = vmatpush2.msra.mxu0 0.0
  %12875 = vmatprep.subr.mxu0 0.0
  %12876 = vmatpush2.msra.mxu0 0.0
  %12877 = vmatprep.subr.mxu0 0.0
  %12878 = vmatpush2.msra.mxu0 0.0
  %12879 = vmatprep.subr.mxu0 0.0
  %12880 = vmatpush2.msra.mxu0 0.0
  %12881 = vmatprep.subr.mxu0 0.0
  %12882 = vmatpush2.msra.mxu0 0.0
  %12883 = vmatprep.subr.mxu0 0.0
  %12884 = vmatpush2.msra.mxu0 0.0
  %12885 = vmatprep.subr.mxu0 0.0
  %12886 = vmatpush2.msra.mxu0 0.0
  %12887 = vmatprep.subr.mxu0 0.0
  %12888 = vmatpush2.msra.mxu0 0.0
  %12889 = vmatprep.subr.mxu0 0.0
  %12890 = vmatpush2.msra.mxu0 0.0
  %12891 = vmatprep.subr.mxu0 0.0
  %12892 = vmatpush2.msra.mxu0 0.0
  %12893 = vmatprep.subr.mxu0 0.0
  %12894 = vmatpush2.msra.mxu0 0.0
  %12895 = vmatprep.subr.mxu0 0.0
  %12896 = vmatpush2.msra.mxu0 0.0
  %12897 = vmatprep.subr.mxu0 0.0
  %12898 = vmatpush2.msra.mxu0 0.0
  %12899 = vmatprep.subr.mxu0 0.0
  %12900 = vmatpush2.msra.mxu0 0.0
  %12901 = vmatprep.subr.mxu0 0.0
  %12902 = vmatpush2.msra.mxu0 0.0
  %12903 = vmatprep.mubr.f32.mxu0 0.0
  %12904 = vmatmul.mubr.f32.gmra.mxu0 %v12648
  %v12905 = vpop.f32.mrf.mxu0
  %v12906 = vadd.f32 0.0, %v12905
  %v12907 = vpop.f32.mrf.mxu0
  %12908 = vmatprep.mubr.f32.mxu0 0.0
  %12909 = vmatmul.mubr.f32.gmra.mxu0 %v12651
  %v12910 = vpop.f32.mrf.mxu0
  %v12911 = vadd.f32 0.0, %v12910
  %v12912 = vpop.f32.mrf.mxu0
  %12913 = vmatprep.mubr.f32.mxu0 0.0
  %12914 = vmatmul.mubr.f32.gmra.mxu0 %v12654
  %v12915 = vpop.f32.mrf.mxu0
  %v12916 = vadd.f32 0.0, %v12915
  %v12917 = vpop.f32.mrf.mxu0
  %12918 = vmatprep.mubr.f32.mxu0 0.0
  %12919 = vmatmul.mubr.f32.gmra.mxu0 %v12657
  %v12920 = vpop.f32.mrf.mxu0
  %v12921 = vadd.f32 0.0, %v12920
  %v12922 = vpop.f32.mrf.mxu0
  %12923 = vmatprep.mubr.f32.mxu0 0.0
  %12924 = vmatmul.mubr.f32.gmra.mxu0 %v12660
  %v12925 = vpop.f32.mrf.mxu0
  %v12926 = vadd.f32 0.0, %v12925
  %v12927 = vpop.f32.mrf.mxu0
  %12928 = vmatprep.mubr.f32.mxu0 0.0
  %12929 = vmatmul.mubr.f32.gmra.mxu0 %v12663
  %v12930 = vpop.f32.mrf.mxu0
  %v12931 = vadd.f32 0.0, %v12930
  %v12932 = vpop.f32.mrf.mxu0
  %12933 = vmatprep.mubr.f32.mxu0 0.0
  %12934 = vmatmul.mubr.f32.gmra.mxu0 %v12666
  %v12935 = vpop.f32.mrf.mxu0
  %v12936 = vadd.f32 0.0, %v12935
  %v12937 = vpop.f32.mrf.mxu0
  %12938 = vmatprep.mubr.f32.mxu0 0.0
  %12939 = vmatmul.mubr.f32.gmra.mxu0 %v12669
  %v12940 = vpop.f32.mrf.mxu0
  %v12941 = vadd.f32 0.0, %v12940
  %v12942 = vpop.f32.mrf.mxu0
  %12943 = vmatprep.mubr.f32.mxu0 0.0
  %12944 = vmatmul.mubr.f32.gmra.mxu0 %v12672
  %v12945 = vpop.f32.mrf.mxu0
  %v12946 = vadd.f32 0.0, %v12945
  %v12947 = vpop.f32.mrf.mxu0
  %12948 = vmatprep.mubr.f32.mxu0 0.0
  %12949 = vmatmul.mubr.f32.gmra.mxu0 %v12675
  %v12950 = vpop.f32.mrf.mxu0
  %v12951 = vadd.f32 0.0, %v12950
  %v12952 = vpop.f32.mrf.mxu0
  %12953 = vmatprep.mubr.f32.mxu0 0.0
  %12954 = vmatmul.mubr.f32.gmra.mxu0 %v12678
  %v12955 = vpop.f32.mrf.mxu0
  %v12956 = vadd.f32 0.0, %v12955
  %v12957 = vpop.f32.mrf.mxu0
  %12958 = vmatprep.mubr.f32.mxu0 0.0
  %12959 = vmatmul.mubr.f32.gmra.mxu0 %v12681
  %v12960 = vpop.f32.mrf.mxu0
  %v12961 = vadd.f32 0.0, %v12960
  %v12962 = vpop.f32.mrf.mxu0
  %12963 = vmatprep.mubr.f32.mxu0 0.0
  %12964 = vmatmul.mubr.f32.gmra.mxu0 %v12684
  %v12965 = vpop.f32.mrf.mxu0
  %v12966 = vadd.f32 0.0, %v12965
  %v12967 = vpop.f32.mrf.mxu0
  %12968 = vmatprep.mubr.f32.mxu0 0.0
  %12969 = vmatmul.mubr.f32.gmra.mxu0 %v12687
  %v12970 = vpop.f32.mrf.mxu0
  %v12971 = vadd.f32 0.0, %v12970
  %v12972 = vpop.f32.mrf.mxu0
  %12973 = vmatprep.mubr.f32.mxu0 0.0
  %12974 = vmatmul.mubr.f32.gmra.mxu0 %v12690
  %v12975 = vpop.f32.mrf.mxu0
  %v12976 = vadd.f32 0.0, %v12975
  %v12977 = vpop.f32.mrf.mxu0
  %12978 = vmatprep.mubr.f32.mxu0 0.0
  %12979 = vmatmul.mubr.f32.gmra.mxu0 %v12693
  %v12980 = vpop.f32.mrf.mxu0
  %v12981 = vadd.f32 0.0, %v12980
  %v12982 = vpop.f32.mrf.mxu0
  %12983 = vmatprep.mubr.f32.mxu0 0.0
  %12984 = vmatmul.mubr.f32.gmra.mxu0 %v12696
  %v12985 = vpop.f32.mrf.mxu0
  %v12986 = vadd.f32 0.0, %v12985
  %v12987 = vpop.f32.mrf.mxu0
  %12988 = vmatprep.mubr.f32.mxu0 0.0
  %12989 = vmatmul.mubr.f32.gmra.mxu0 %v12699
  %v12990 = vpop.f32.mrf.mxu0
  %v12991 = vadd.f32 0.0, %v12990
  %v12992 = vpop.f32.mrf.mxu0
  %12993 = vmatprep.mubr.f32.mxu0 0.0
  %12994 = vmatmul.mubr.f32.gmra.mxu0 %v12702
  %v12995 = vpop.f32.mrf.mxu0
  %v12996 = vadd.f32 0.0, %v12995
  %v12997 = vpop.f32.mrf.mxu0
  %12998 = vmatprep.mubr.f32.mxu0 0.0
  %12999 = vmatmul.mubr.f32.gmra.mxu0 %v12705
  %v13000 = vpop.f32.mrf.mxu0
  %v13001 = vadd.f32 0.0, %v13000
  %v13002 = vpop.f32.mrf.mxu0
  %13003 = vmatprep.mubr.f32.mxu0 0.0
  %13004 = vmatmul.mubr.f32.gmra.mxu0 %v12708
  %v13005 = vpop.f32.mrf.mxu0
  %v13006 = vadd.f32 0.0, %v13005
  %v13007 = vpop.f32.mrf.mxu0
  %13008 = vmatprep.mubr.f32.mxu0 0.0
  %13009 = vmatmul.mubr.f32.gmra.mxu0 %v12711
  %v13010 = vpop.f32.mrf.mxu0
  %v13011 = vadd.f32 0.0, %v13010
  %v13012 = vpop.f32.mrf.mxu0
  %13013 = vmatprep.mubr.f32.mxu0 0.0
  %13014 = vmatmul.mubr.f32.gmra.mxu0 %v12714
  %v13015 = vpop.f32.mrf.mxu0
  %v13016 = vadd.f32 0.0, %v13015
  %v13017 = vpop.f32.mrf.mxu0
  %13018 = vmatprep.mubr.f32.mxu0 0.0
  %13019 = vmatmul.mubr.f32.gmra.mxu0 %v12717
  %v13020 = vpop.f32.mrf.mxu0
  %v13021 = vadd.f32 0.0, %v13020
  %v13022 = vpop.f32.mrf.mxu0
  %13023 = vmatprep.mubr.f32.mxu0 0.0
  %13024 = vmatmul.mubr.f32.gmra.mxu0 %v12720
  %v13025 = vpop.f32.mrf.mxu0
  %v13026 = vadd.f32 0.0, %v13025
  %v13027 = vpop.f32.mrf.mxu0
  %13028 = vmatprep.mubr.f32.mxu0 0.0
  %13029 = vmatmul.mubr.f32.gmra.mxu0 %v12723
  %v13030 = vpop.f32.mrf.mxu0
  %v13031 = vadd.f32 0.0, %v13030
  %v13032 = vpop.f32.mrf.mxu0
  %13033 = vmatprep.mubr.f32.mxu0 0.0
  %13034 = vmatmul.mubr.f32.gmra.mxu0 %v12726
  %v13035 = vpop.f32.mrf.mxu0
  %v13036 = vadd.f32 0.0, %v13035
  %v13037 = vpop.f32.mrf.mxu0
  %13038 = vmatprep.mubr.f32.mxu0 0.0
  %13039 = vmatmul.mubr.f32.gmra.mxu0 %v12729
  %v13040 = vpop.f32.mrf.mxu0
  %v13041 = vadd.f32 0.0, %v13040
  %v13042 = vpop.f32.mrf.mxu0
  %13043 = vmatprep.mubr.f32.mxu0 0.0
  %13044 = vmatmul.mubr.f32.gmra.mxu0 %v12732
  %v13045 = vpop.f32.mrf.mxu0
  %v13046 = vadd.f32 0.0, %v13045
  %v13047 = vpop.f32.mrf.mxu0
  %13048 = vmatprep.mubr.f32.mxu0 0.0
  %13049 = vmatmul.mubr.f32.gmra.mxu0 %v12735
  %v13050 = vpop.f32.mrf.mxu0
  %v13051 = vadd.f32 0.0, %v13050
  %v13052 = vpop.f32.mrf.mxu0
  %13053 = vmatprep.mubr.f32.mxu0 0.0
  %13054 = vmatmul.mubr.f32.gmra.mxu0 %v12738
  %v13055 = vpop.f32.mrf.mxu0
  %v13056 = vadd.f32 0.0, %v13055
  %v13057 = vpop.f32.mrf.mxu0
  %13058 = vmatprep.mubr.f32.mxu0 0.0
  %13059 = vmatmul.mubr.f32.gmra.mxu0 %v12741
  %v13060 = vpop.f32.mrf.mxu0
  %v13061 = vadd.f32 0.0, %v13060
  %v13062 = vpop.f32.mrf.mxu0
  %13063 = vmatprep.mubr.f32.mxu0 0.0
  %13064 = vmatmul.mubr.f32.gmra.mxu0 %v12744
  %v13065 = vpop.f32.mrf.mxu0
  %v13066 = vadd.f32 0.0, %v13065
  %v13067 = vpop.f32.mrf.mxu0
  %13068 = vmatprep.mubr.f32.mxu0 0.0
  %13069 = vmatmul.mubr.f32.gmra.mxu0 %v12747
  %v13070 = vpop.f32.mrf.mxu0
  %v13071 = vadd.f32 0.0, %v13070
  %v13072 = vpop.f32.mrf.mxu0
  %13073 = vmatprep.mubr.f32.mxu0 0.0
  %13074 = vmatmul.mubr.f32.gmra.mxu0 %v12750
  %v13075 = vpop.f32.mrf.mxu0
  %v13076 = vadd.f32 0.0, %v13075
  %v13077 = vpop.f32.mrf.mxu0
  %13078 = vmatprep.mubr.f32.mxu0 0.0
  %13079 = vmatmul.mubr.f32.gmra.mxu0 %v12753
  %v13080 = vpop.f32.mrf.mxu0
  %v13081 = vadd.f32 0.0, %v13080
  %v13082 = vpop.f32.mrf.mxu0
  %13083 = vmatprep.mubr.f32.mxu0 0.0
  %13084 = vmatmul.mubr.f32.gmra.mxu0 %v12756
  %v13085 = vpop.f32.mrf.mxu0
  %v13086 = vadd.f32 0.0, %v13085
  %v13087 = vpop.f32.mrf.mxu0
  %13088 = vmatprep.mubr.f32.mxu0 0.0
  %13089 = vmatmul.mubr.f32.gmra.mxu0 %v12759
  %v13090 = vpop.f32.mrf.mxu0
  %v13091 = vadd.f32 0.0, %v13090
  %v13092 = vpop.f32.mrf.mxu0
  %13093 = vmatprep.mubr.f32.mxu0 0.0
  %13094 = vmatmul.mubr.f32.gmra.mxu0 %v12762
  %v13095 = vpop.f32.mrf.mxu0
  %v13096 = vadd.f32 0.0, %v13095
  %v13097 = vpop.f32.mrf.mxu0
  %13098 = vmatprep.mubr.f32.mxu0 0.0
  %13099 = vmatmul.mubr.f32.gmra.mxu0 %v12765
  %v13100 = vpop.f32.mrf.mxu0
  %v13101 = vadd.f32 0.0, %v13100
  %v13102 = vpop.f32.mrf.mxu0
  %13103 = vmatprep.mubr.f32.mxu0 0.0
  %13104 = vmatmul.mubr.f32.gmra.mxu0 %v12768
  %v13105 = vpop.f32.mrf.mxu0
  %v13106 = vadd.f32 0.0, %v13105
  %v13107 = vpop.f32.mrf.mxu0
  %13108 = vmatprep.mubr.f32.mxu0 0.0
  %13109 = vmatmul.mubr.f32.gmra.mxu0 %v12771
  %v13110 = vpop.f32.mrf.mxu0
  %v13111 = vadd.f32 0.0, %v13110
  %v13112 = vpop.f32.mrf.mxu0
  %13113 = vmatprep.mubr.f32.mxu0 0.0
  %13114 = vmatmul.mubr.f32.gmra.mxu0 %v12774
  %v13115 = vpop.f32.mrf.mxu0
  %v13116 = vadd.f32 0.0, %v13115
  %v13117 = vpop.f32.mrf.mxu0
  %13118 = vmatprep.mubr.f32.mxu0 0.0
  %13119 = vmatmul.mubr.f32.gmra.mxu0 %v12777
  %v13120 = vpop.f32.mrf.mxu0
  %v13121 = vadd.f32 0.0, %v13120
  %v13122 = vpop.f32.mrf.mxu0
  %13123 = vmatprep.mubr.f32.mxu0 0.0
  %13124 = vmatmul.mubr.f32.gmra.mxu0 %v12780
  %v13125 = vpop.f32.mrf.mxu0
  %v13126 = vadd.f32 0.0, %v13125
  %v13127 = vpop.f32.mrf.mxu0
  %13128 = vmatprep.mubr.f32.mxu0 0.0
  %13129 = vmatmul.mubr.f32.gmra.mxu0 %v12783
  %v13130 = vpop.f32.mrf.mxu0
  %v13131 = vadd.f32 0.0, %v13130
  %v13132 = vpop.f32.mrf.mxu0
  %13133 = vmatprep.mubr.f32.mxu0 0.0
  %13134 = vmatmul.mubr.f32.gmra.mxu0 %v12786
  %v13135 = vpop.f32.mrf.mxu0
  %v13136 = vadd.f32 0.0, %v13135
  %v13137 = vpop.f32.mrf.mxu0
  %13138 = vmatprep.mubr.f32.mxu0 0.0
  %13139 = vmatmul.mubr.f32.gmra.mxu0 %v12789
  %v13140 = vpop.f32.mrf.mxu0
  %v13141 = vadd.f32 0.0, %v13140
  %v13142 = vpop.f32.mrf.mxu0
  %13143 = vmatprep.mubr.f32.mxu0 0.0
  %13144 = vmatmul.mubr.f32.gmra.mxu0 %v12792
  %v13145 = vpop.f32.mrf.mxu0
  %v13146 = vadd.f32 0.0, %v13145
  %v13147 = vpop.f32.mrf.mxu0
  %13148 = vmatprep.mubr.f32.mxu0 0.0
  %13149 = vmatmul.mubr.f32.gmra.mxu0 %v12795
  %v13150 = vpop.f32.mrf.mxu0
  %v13151 = vadd.f32 0.0, %v13150
  %v13152 = vpop.f32.mrf.mxu0
  %13153 = vmatprep.mubr.f32.mxu0 0.0
  %13154 = vmatmul.mubr.f32.gmra.mxu0 %v12798
  %v13155 = vpop.f32.mrf.mxu0
  %v13156 = vadd.f32 0.0, %v13155
  %v13157 = vpop.f32.mrf.mxu0
  %13158 = vmatprep.mubr.f32.mxu0 0.0
  %13159 = vmatmul.mubr.f32.gmra.mxu0 %v12801
  %v13160 = vpop.f32.mrf.mxu0
  %v13161 = vadd.f32 0.0, %v13160
  %v13162 = vpop.f32.mrf.mxu0
  %13163 = vmatprep.mubr.f32.mxu0 0.0
  %13164 = vmatmul.mubr.f32.gmra.mxu0 %v12804
  %v13165 = vpop.f32.mrf.mxu0
  %v13166 = vadd.f32 0.0, %v13165
  %v13167 = vpop.f32.mrf.mxu0
  %13168 = vmatprep.mubr.f32.mxu0 0.0
  %13169 = vmatmul.mubr.f32.gmra.mxu0 %v12807
  %v13170 = vpop.f32.mrf.mxu0
  %v13171 = vadd.f32 0.0, %v13170
  %v13172 = vpop.f32.mrf.mxu0
  %13173 = vmatprep.mubr.f32.mxu0 0.0
  %13174 = vmatmul.mubr.f32.gmra.mxu0 %v12810
  %v13175 = vpop.f32.mrf.mxu0
  %v13176 = vadd.f32 0.0, %v13175
  %v13177 = vpop.f32.mrf.mxu0
  %13178 = vmatprep.mubr.f32.mxu0 0.0
  %13179 = vmatmul.mubr.f32.gmra.mxu0 %v12813
  %v13180 = vpop.f32.mrf.mxu0
  %v13181 = vadd.f32 0.0, %v13180
  %v13182 = vpop.f32.mrf.mxu0
  %13183 = vmatprep.mubr.f32.mxu0 0.0
  %13184 = vmatmul.mubr.f32.gmra.mxu0 %v12816
  %v13185 = vpop.f32.mrf.mxu0
  %v13186 = vadd.f32 0.0, %v13185
  %v13187 = vpop.f32.mrf.mxu0
  %13188 = vmatprep.mubr.f32.mxu0 0.0
  %13189 = vmatmul.mubr.f32.gmra.mxu0 %v12819
  %v13190 = vpop.f32.mrf.mxu0
  %v13191 = vadd.f32 0.0, %v13190
  %v13192 = vpop.f32.mrf.mxu0
  %13193 = vmatprep.mubr.f32.mxu0 0.0
  %13194 = vmatmul.mubr.f32.gmra.mxu0 %v12822
  %v13195 = vpop.f32.mrf.mxu0
  %v13196 = vadd.f32 0.0, %v13195
  %v13197 = vpop.f32.mrf.mxu0
  %13198 = vmatprep.mubr.f32.mxu0 0.0
  %13199 = vmatmul.mubr.f32.gmra.mxu0 %v12825
  %v13200 = vpop.f32.mrf.mxu0
  %v13201 = vadd.f32 0.0, %v13200
  %v13202 = vpop.f32.mrf.mxu0
  %13203 = vmatprep.mubr.f32.mxu0 0.0
  %13204 = vmatmul.mubr.f32.gmra.mxu0 %v12828
  %v13205 = vpop.f32.mrf.mxu0
  %v13206 = vadd.f32 0.0, %v13205
  %v13207 = vpop.f32.mrf.mxu0
  %13208 = vmatprep.mubr.f32.mxu0 0.0
  %13209 = vmatmul.mubr.f32.gmra.mxu0 %v12831
  %v13210 = vpop.f32.mrf.mxu0
  %v13211 = vadd.f32 0.0, %v13210
  %v13212 = vpop.f32.mrf.mxu0
  %13213 = vmatprep.mubr.f32.mxu0 0.0
  %13214 = vmatmul.mubr.f32.gmra.mxu0 %v12834
  %v13215 = vpop.f32.mrf.mxu0
  %v13216 = vadd.f32 0.0, %v13215
  %v13217 = vpop.f32.mrf.mxu0
  %13218 = vmatprep.mubr.f32.mxu0 0.0
  %13219 = vmatmul.mubr.f32.gmra.mxu0 %v12837
  %v13220 = vpop.f32.mrf.mxu0
  %v13221 = vadd.f32 0.0, %v13220
  %v13222 = vpop.f32.mrf.mxu0
  %13223 = vdwg.mxu0
  %v13224 = vadd.f32 %v12517, %v12906
  %v13225 = vadd.f32 %v12518, %v12911
  %v13226 = vadd.f32 %v12519, %v12916
  %v13227 = vadd.f32 %v12520, %v12921
  %v13228 = vadd.f32 %v12521, %v12926
  %v13229 = vadd.f32 %v12522, %v12931
  %v13230 = vadd.f32 %v12523, %v12936
  %v13231 = vadd.f32 %v12524, %v12941
  %v13232 = vadd.f32 %v12525, %v12946
  %v13233 = vadd.f32 %v12526, %v12951
  %v13234 = vadd.f32 %v12527, %v12956
  %v13235 = vadd.f32 %v12528, %v12961
  %v13236 = vadd.f32 %v12529, %v12966
  %v13237 = vadd.f32 %v12530, %v12971
  %v13238 = vadd.f32 %v12531, %v12976
  %v13239 = vadd.f32 %v12532, %v12981
  %v13240 = vadd.f32 %v12533, %v12986
  %v13241 = vadd.f32 %v12534, %v12991
  %v13242 = vadd.f32 %v12535, %v12996
  %v13243 = vadd.f32 %v12536, %v13001
  %v13244 = vadd.f32 %v12537, %v13006
  %v13245 = vadd.f32 %v12538, %v13011
  %v13246 = vadd.f32 %v12539, %v13016
  %v13247 = vadd.f32 %v12540, %v13021
  %v13248 = vadd.f32 %v12541, %v13026
  %v13249 = vadd.f32 %v12542, %v13031
  %v13250 = vadd.f32 %v12543, %v13036
  %v13251 = vadd.f32 %v12544, %v13041
  %v13252 = vadd.f32 %v12545, %v13046
  %v13253 = vadd.f32 %v12546, %v13051
  %v13254 = vadd.f32 %v12547, %v13056
  %v13255 = vadd.f32 %v12548, %v13061
  %v13256 = vadd.f32 %v12549, %v13066
  %v13257 = vadd.f32 %v12550, %v13071
  %v13258 = vadd.f32 %v12551, %v13076
  %v13259 = vadd.f32 %v12552, %v13081
  %v13260 = vadd.f32 %v12553, %v13086
  %v13261 = vadd.f32 %v12554, %v13091
  %v13262 = vadd.f32 %v12555, %v13096
  %v13263 = vadd.f32 %v12556, %v13101
  %v13264 = vadd.f32 %v12557, %v13106
  %v13265 = vadd.f32 %v12558, %v13111
  %v13266 = vadd.f32 %v12559, %v13116
  %v13267 = vadd.f32 %v12560, %v13121
  %v13268 = vadd.f32 %v12561, %v13126
  %v13269 = vadd.f32 %v12562, %v13131
  %v13270 = vadd.f32 %v12563, %v13136
  %v13271 = vadd.f32 %v12564, %v13141
  %v13272 = vadd.f32 %v12565, %v13146
  %v13273 = vadd.f32 %v12566, %v13151
  %v13274 = vadd.f32 %v12567, %v13156
  %v13275 = vadd.f32 %v12568, %v13161
  %v13276 = vadd.f32 %v12569, %v13166
  %v13277 = vadd.f32 %v12570, %v13171
  %v13278 = vadd.f32 %v12571, %v13176
  %v13279 = vadd.f32 %v12572, %v13181
  %v13280 = vadd.f32 %v12573, %v13186
  %v13281 = vadd.f32 %v12574, %v13191
  %v13282 = vadd.f32 %v12575, %v13196
  %v13283 = vadd.f32 %v12576, %v13201
  %v13284 = vadd.f32 %v12577, %v13206
  %v13285 = vadd.f32 %v12578, %v13211
  %v13286 = vadd.f32 %v12579, %v13216
  %v13287 = vadd.f32 %v12580, %v13221
  %v13288 = vlaneseq
  %v13289 = vshrl.u32 %v13288, 7
  %v13290 = vsub.s32 0, %v13289
  %v13291 = vrot.slane %v23, %v13290
  %v13292 = vadd.f32 %v13224, %v13291
  %v13293 = vadd.f32 %v13225, %v13291
  %v13294 = vadd.f32 %v13226, %v13291
  %v13295 = vadd.f32 %v13227, %v13291
  %v13296 = vadd.f32 %v13228, %v13291
  %v13297 = vadd.f32 %v13229, %v13291
  %v13298 = vadd.f32 %v13230, %v13291
  %v13299 = vadd.f32 %v13231, %v13291
  %v13300 = vadd.f32 %v13232, %v13291
  %v13301 = vadd.f32 %v13233, %v13291
  %v13302 = vadd.f32 %v13234, %v13291
  %v13303 = vadd.f32 %v13235, %v13291
  %v13304 = vadd.f32 %v13236, %v13291
  %v13305 = vadd.f32 %v13237, %v13291
  %v13306 = vadd.f32 %v13238, %v13291
  %v13307 = vadd.f32 %v13239, %v13291
  %v13308 = vadd.f32 %v13240, %v13291
  %v13309 = vadd.f32 %v13241, %v13291
  %v13310 = vadd.f32 %v13242, %v13291
  %v13311 = vadd.f32 %v13243, %v13291
  %v13312 = vadd.f32 %v13244, %v13291
  %v13313 = vadd.f32 %v13245, %v13291
  %v13314 = vadd.f32 %v13246, %v13291
  %v13315 = vadd.f32 %v13247, %v13291
  %v13316 = vadd.f32 %v13248, %v13291
  %v13317 = vadd.f32 %v13249, %v13291
  %v13318 = vadd.f32 %v13250, %v13291
  %v13319 = vadd.f32 %v13251, %v13291
  %v13320 = vadd.f32 %v13252, %v13291
  %v13321 = vadd.f32 %v13253, %v13291
  %v13322 = vadd.f32 %v13254, %v13291
  %v13323 = vadd.f32 %v13255, %v13291
  %v13324 = vadd.f32 %v13256, %v13291
  %v13325 = vadd.f32 %v13257, %v13291
  %v13326 = vadd.f32 %v13258, %v13291
  %v13327 = vadd.f32 %v13259, %v13291
  %v13328 = vadd.f32 %v13260, %v13291
  %v13329 = vadd.f32 %v13261, %v13291
  %v13330 = vadd.f32 %v13262, %v13291
  %v13331 = vadd.f32 %v13263, %v13291
  %v13332 = vadd.f32 %v13264, %v13291
  %v13333 = vadd.f32 %v13265, %v13291
  %v13334 = vadd.f32 %v13266, %v13291
  %v13335 = vadd.f32 %v13267, %v13291
  %v13336 = vadd.f32 %v13268, %v13291
  %v13337 = vadd.f32 %v13269, %v13291
  %v13338 = vadd.f32 %v13270, %v13291
  %v13339 = vadd.f32 %v13271, %v13291
  %v13340 = vadd.f32 %v13272, %v13291
  %v13341 = vadd.f32 %v13273, %v13291
  %v13342 = vadd.f32 %v13274, %v13291
  %v13343 = vadd.f32 %v13275, %v13291
  %v13344 = vadd.f32 %v13276, %v13291
  %v13345 = vadd.f32 %v13277, %v13291
  %v13346 = vadd.f32 %v13278, %v13291
  %v13347 = vadd.f32 %v13279, %v13291
  %v13348 = vadd.f32 %v13280, %v13291
  %v13349 = vadd.f32 %v13281, %v13291
  %v13350 = vadd.f32 %v13282, %v13291
  %v13351 = vadd.f32 %v13283, %v13291
  %v13352 = vadd.f32 %v13284, %v13291
  %v13353 = vadd.f32 %v13285, %v13291
  %v13354 = vadd.f32 %v13286, %v13291
  %v13355 = vadd.f32 %v13287, %v13291
  %v13356 = vsel %vm6360, %v13292, 0.0
  %v13357 = vsel %vm6360, %v13293, 0.0
  %v13358 = vadd.f32 %v13356, %v13357
  %v13359 = vsel %vm6360, %v13294, 0.0
  %v13360 = vadd.f32 %v13358, %v13359
  %v13361 = vsel %vm6360, %v13295, 0.0
  %v13362 = vadd.f32 %v13360, %v13361
  %v13363 = vsel %vm6360, %v13296, 0.0
  %v13364 = vadd.f32 %v13362, %v13363
  %v13365 = vsel %vm6360, %v13297, 0.0
  %v13366 = vadd.f32 %v13364, %v13365
  %v13367 = vsel %vm6360, %v13298, 0.0
  %v13368 = vadd.f32 %v13366, %v13367
  %v13369 = vsel %vm6360, %v13299, 0.0
  %v13370 = vadd.f32 %v13368, %v13369
  %v13371 = vsel %vm6360, %v13300, 0.0
  %v13372 = vadd.f32 %v13370, %v13371
  %v13373 = vsel %vm6360, %v13301, 0.0
  %v13374 = vadd.f32 %v13372, %v13373
  %v13375 = vsel %vm6360, %v13302, 0.0
  %v13376 = vadd.f32 %v13374, %v13375
  %v13377 = vsel %vm6360, %v13303, 0.0
  %v13378 = vadd.f32 %v13376, %v13377
  %v13379 = vsel %vm6360, %v13304, 0.0
  %v13380 = vadd.f32 %v13378, %v13379
  %v13381 = vsel %vm6360, %v13305, 0.0
  %v13382 = vadd.f32 %v13380, %v13381
  %v13383 = vsel %vm6360, %v13306, 0.0
  %v13384 = vadd.f32 %v13382, %v13383
  %v13385 = vsel %vm6360, %v13307, 0.0
  %v13386 = vadd.f32 %v13384, %v13385
  %v13387 = vsel %vm6360, %v13308, 0.0
  %v13388 = vadd.f32 %v13386, %v13387
  %v13389 = vsel %vm6360, %v13309, 0.0
  %v13390 = vadd.f32 %v13388, %v13389
  %v13391 = vsel %vm6360, %v13310, 0.0
  %v13392 = vadd.f32 %v13390, %v13391
  %v13393 = vsel %vm6360, %v13311, 0.0
  %v13394 = vadd.f32 %v13392, %v13393
  %v13395 = vsel %vm6360, %v13312, 0.0
  %v13396 = vadd.f32 %v13394, %v13395
  %v13397 = vsel %vm6360, %v13313, 0.0
  %v13398 = vadd.f32 %v13396, %v13397
  %v13399 = vsel %vm6360, %v13314, 0.0
  %v13400 = vadd.f32 %v13398, %v13399
  %v13401 = vsel %vm6360, %v13315, 0.0
  %v13402 = vadd.f32 %v13400, %v13401
  %v13403 = vsel %vm6360, %v13316, 0.0
  %v13404 = vadd.f32 %v13402, %v13403
  %v13405 = vsel %vm6360, %v13317, 0.0
  %v13406 = vadd.f32 %v13404, %v13405
  %v13407 = vsel %vm6360, %v13318, 0.0
  %v13408 = vadd.f32 %v13406, %v13407
  %v13409 = vsel %vm6360, %v13319, 0.0
  %v13410 = vadd.f32 %v13408, %v13409
  %v13411 = vsel %vm6360, %v13320, 0.0
  %v13412 = vadd.f32 %v13410, %v13411
  %v13413 = vsel %vm6360, %v13321, 0.0
  %v13414 = vadd.f32 %v13412, %v13413
  %v13415 = vsel %vm6360, %v13322, 0.0
  %v13416 = vadd.f32 %v13414, %v13415
  %v13417 = vsel %vm6360, %v13323, 0.0
  %v13418 = vadd.f32 %v13416, %v13417
  %v13419 = vsel %vm6360, %v13324, 0.0
  %v13420 = vadd.f32 %v13418, %v13419
  %v13421 = vsel %vm6360, %v13325, 0.0
  %v13422 = vadd.f32 %v13420, %v13421
  %v13423 = vsel %vm6360, %v13326, 0.0
  %v13424 = vadd.f32 %v13422, %v13423
  %v13425 = vsel %vm6360, %v13327, 0.0
  %v13426 = vadd.f32 %v13424, %v13425
  %v13427 = vsel %vm6360, %v13328, 0.0
  %v13428 = vadd.f32 %v13426, %v13427
  %v13429 = vsel %vm6360, %v13329, 0.0
  %v13430 = vadd.f32 %v13428, %v13429
  %v13431 = vsel %vm6360, %v13330, 0.0
  %v13432 = vadd.f32 %v13430, %v13431
  %v13433 = vsel %vm6360, %v13331, 0.0
  %v13434 = vadd.f32 %v13432, %v13433
  %v13435 = vsel %vm6360, %v13332, 0.0
  %v13436 = vadd.f32 %v13434, %v13435
  %v13437 = vsel %vm6360, %v13333, 0.0
  %v13438 = vadd.f32 %v13436, %v13437
  %v13439 = vsel %vm6360, %v13334, 0.0
  %v13440 = vadd.f32 %v13438, %v13439
  %v13441 = vsel %vm6360, %v13335, 0.0
  %v13442 = vadd.f32 %v13440, %v13441
  %v13443 = vsel %vm6360, %v13336, 0.0
  %v13444 = vadd.f32 %v13442, %v13443
  %v13445 = vsel %vm6360, %v13337, 0.0
  %v13446 = vadd.f32 %v13444, %v13445
  %v13447 = vsel %vm6360, %v13338, 0.0
  %v13448 = vadd.f32 %v13446, %v13447
  %v13449 = vsel %vm6360, %v13339, 0.0
  %v13450 = vadd.f32 %v13448, %v13449
  %v13451 = vsel %vm6360, %v13340, 0.0
  %v13452 = vadd.f32 %v13450, %v13451
  %v13453 = vsel %vm6360, %v13341, 0.0
  %v13454 = vadd.f32 %v13452, %v13453
  %v13455 = vsel %vm6360, %v13342, 0.0
  %v13456 = vadd.f32 %v13454, %v13455
  %v13457 = vsel %vm6360, %v13343, 0.0
  %v13458 = vadd.f32 %v13456, %v13457
  %v13459 = vsel %vm6360, %v13344, 0.0
  %v13460 = vadd.f32 %v13458, %v13459
  %v13461 = vsel %vm6360, %v13345, 0.0
  %v13462 = vadd.f32 %v13460, %v13461
  %v13463 = vsel %vm6360, %v13346, 0.0
  %v13464 = vadd.f32 %v13462, %v13463
  %v13465 = vsel %vm6360, %v13347, 0.0
  %v13466 = vadd.f32 %v13464, %v13465
  %v13467 = vsel %vm6360, %v13348, 0.0
  %v13468 = vadd.f32 %v13466, %v13467
  %v13469 = vsel %vm6360, %v13349, 0.0
  %v13470 = vadd.f32 %v13468, %v13469
  %v13471 = vsel %vm6360, %v13350, 0.0
  %v13472 = vadd.f32 %v13470, %v13471
  %v13473 = vsel %vm6360, %v13351, 0.0
  %v13474 = vadd.f32 %v13472, %v13473
  %v13475 = vsel %vm6360, %v13352, 0.0
  %v13476 = vadd.f32 %v13474, %v13475
  %v13477 = vsel %vm6360, %v13353, 0.0
  %v13478 = vadd.f32 %v13476, %v13477
  %v13479 = vsel %vm6360, %v13354, 0.0
  %v13480 = vadd.f32 %v13478, %v13479
  %v13481 = vsel %vm6360, %v13355, 0.0
  %v13482 = vadd.f32 %v13480, %v13481
  %v13483 = vrot.slane %v13482, 4
  %v13484 = vadd.f32 %v13482, %v13483
  %v13485 = vrot.slane %v13484, 2
  %v13486 = vadd.f32 %v13484, %v13485
  %v13487 = vrot.slane %v13486, 1
  %v13488 = vadd.f32 %v13486, %v13487
  %v13489 = vmul.f32 %v13488, %v6494
  %v13490 = vmul.f32 %v13292, %v13292
  %v13491 = vmul.f32 %v13293, %v13293
  %v13492 = vmul.f32 %v13294, %v13294
  %v13493 = vmul.f32 %v13295, %v13295
  %v13494 = vmul.f32 %v13296, %v13296
  %v13495 = vmul.f32 %v13297, %v13297
  %v13496 = vmul.f32 %v13298, %v13298
  %v13497 = vmul.f32 %v13299, %v13299
  %v13498 = vmul.f32 %v13300, %v13300
  %v13499 = vmul.f32 %v13301, %v13301
  %v13500 = vmul.f32 %v13302, %v13302
  %v13501 = vmul.f32 %v13303, %v13303
  %v13502 = vmul.f32 %v13304, %v13304
  %v13503 = vmul.f32 %v13305, %v13305
  %v13504 = vmul.f32 %v13306, %v13306
  %v13505 = vmul.f32 %v13307, %v13307
  %v13506 = vmul.f32 %v13308, %v13308
  %v13507 = vmul.f32 %v13309, %v13309
  %v13508 = vmul.f32 %v13310, %v13310
  %v13509 = vmul.f32 %v13311, %v13311
  %v13510 = vmul.f32 %v13312, %v13312
  %v13511 = vmul.f32 %v13313, %v13313
  %v13512 = vmul.f32 %v13314, %v13314
  %v13513 = vmul.f32 %v13315, %v13315
  %v13514 = vmul.f32 %v13316, %v13316
  %v13515 = vmul.f32 %v13317, %v13317
  %v13516 = vmul.f32 %v13318, %v13318
  %v13517 = vmul.f32 %v13319, %v13319
  %v13518 = vmul.f32 %v13320, %v13320
  %v13519 = vmul.f32 %v13321, %v13321
  %v13520 = vmul.f32 %v13322, %v13322
  %v13521 = vmul.f32 %v13323, %v13323
  %v13522 = vmul.f32 %v13324, %v13324
  %v13523 = vmul.f32 %v13325, %v13325
  %v13524 = vmul.f32 %v13326, %v13326
  %v13525 = vmul.f32 %v13327, %v13327
  %v13526 = vmul.f32 %v13328, %v13328
  %v13527 = vmul.f32 %v13329, %v13329
  %v13528 = vmul.f32 %v13330, %v13330
  %v13529 = vmul.f32 %v13331, %v13331
  %v13530 = vmul.f32 %v13332, %v13332
  %v13531 = vmul.f32 %v13333, %v13333
  %v13532 = vmul.f32 %v13334, %v13334
  %v13533 = vmul.f32 %v13335, %v13335
  %v13534 = vmul.f32 %v13336, %v13336
  %v13535 = vmul.f32 %v13337, %v13337
  %v13536 = vmul.f32 %v13338, %v13338
  %v13537 = vmul.f32 %v13339, %v13339
  %v13538 = vmul.f32 %v13340, %v13340
  %v13539 = vmul.f32 %v13341, %v13341
  %v13540 = vmul.f32 %v13342, %v13342
  %v13541 = vmul.f32 %v13343, %v13343
  %v13542 = vmul.f32 %v13344, %v13344
  %v13543 = vmul.f32 %v13345, %v13345
  %v13544 = vmul.f32 %v13346, %v13346
  %v13545 = vmul.f32 %v13347, %v13347
  %v13546 = vmul.f32 %v13348, %v13348
  %v13547 = vmul.f32 %v13349, %v13349
  %v13548 = vmul.f32 %v13350, %v13350
  %v13549 = vmul.f32 %v13351, %v13351
  %v13550 = vmul.f32 %v13352, %v13352
  %v13551 = vmul.f32 %v13353, %v13353
  %v13552 = vmul.f32 %v13354, %v13354
  %v13553 = vmul.f32 %v13355, %v13355
  %v13554 = vsel %vm6360, %v13490, 0.0
  %v13555 = vsel %vm6360, %v13491, 0.0
  %v13556 = vadd.f32 %v13554, %v13555
  %v13557 = vsel %vm6360, %v13492, 0.0
  %v13558 = vadd.f32 %v13556, %v13557
  %v13559 = vsel %vm6360, %v13493, 0.0
  %v13560 = vadd.f32 %v13558, %v13559
  %v13561 = vsel %vm6360, %v13494, 0.0
  %v13562 = vadd.f32 %v13560, %v13561
  %v13563 = vsel %vm6360, %v13495, 0.0
  %v13564 = vadd.f32 %v13562, %v13563
  %v13565 = vsel %vm6360, %v13496, 0.0
  %v13566 = vadd.f32 %v13564, %v13565
  %v13567 = vsel %vm6360, %v13497, 0.0
  %v13568 = vadd.f32 %v13566, %v13567
  %v13569 = vsel %vm6360, %v13498, 0.0
  %v13570 = vadd.f32 %v13568, %v13569
  %v13571 = vsel %vm6360, %v13499, 0.0
  %v13572 = vadd.f32 %v13570, %v13571
  %v13573 = vsel %vm6360, %v13500, 0.0
  %v13574 = vadd.f32 %v13572, %v13573
  %v13575 = vsel %vm6360, %v13501, 0.0
  %v13576 = vadd.f32 %v13574, %v13575
  %v13577 = vsel %vm6360, %v13502, 0.0
  %v13578 = vadd.f32 %v13576, %v13577
  %v13579 = vsel %vm6360, %v13503, 0.0
  %v13580 = vadd.f32 %v13578, %v13579
  %v13581 = vsel %vm6360, %v13504, 0.0
  %v13582 = vadd.f32 %v13580, %v13581
  %v13583 = vsel %vm6360, %v13505, 0.0
  %v13584 = vadd.f32 %v13582, %v13583
  %v13585 = vsel %vm6360, %v13506, 0.0
  %v13586 = vadd.f32 %v13584, %v13585
  %v13587 = vsel %vm6360, %v13507, 0.0
  %v13588 = vadd.f32 %v13586, %v13587
  %v13589 = vsel %vm6360, %v13508, 0.0
  %v13590 = vadd.f32 %v13588, %v13589
  %v13591 = vsel %vm6360, %v13509, 0.0
  %v13592 = vadd.f32 %v13590, %v13591
  %v13593 = vsel %vm6360, %v13510, 0.0
  %v13594 = vadd.f32 %v13592, %v13593
  %v13595 = vsel %vm6360, %v13511, 0.0
  %v13596 = vadd.f32 %v13594, %v13595
  %v13597 = vsel %vm6360, %v13512, 0.0
  %v13598 = vadd.f32 %v13596, %v13597
  %v13599 = vsel %vm6360, %v13513, 0.0
  %v13600 = vadd.f32 %v13598, %v13599
  %v13601 = vsel %vm6360, %v13514, 0.0
  %v13602 = vadd.f32 %v13600, %v13601
  %v13603 = vsel %vm6360, %v13515, 0.0
  %v13604 = vadd.f32 %v13602, %v13603
  %v13605 = vsel %vm6360, %v13516, 0.0
  %v13606 = vadd.f32 %v13604, %v13605
  %v13607 = vsel %vm6360, %v13517, 0.0
  %v13608 = vadd.f32 %v13606, %v13607
  %v13609 = vsel %vm6360, %v13518, 0.0
  %v13610 = vadd.f32 %v13608, %v13609
  %v13611 = vsel %vm6360, %v13519, 0.0
  %v13612 = vadd.f32 %v13610, %v13611
  %v13613 = vsel %vm6360, %v13520, 0.0
  %v13614 = vadd.f32 %v13612, %v13613
  %v13615 = vsel %vm6360, %v13521, 0.0
  %v13616 = vadd.f32 %v13614, %v13615
  %v13617 = vsel %vm6360, %v13522, 0.0
  %v13618 = vadd.f32 %v13616, %v13617
  %v13619 = vsel %vm6360, %v13523, 0.0
  %v13620 = vadd.f32 %v13618, %v13619
  %v13621 = vsel %vm6360, %v13524, 0.0
  %v13622 = vadd.f32 %v13620, %v13621
  %v13623 = vsel %vm6360, %v13525, 0.0
  %v13624 = vadd.f32 %v13622, %v13623
  %v13625 = vsel %vm6360, %v13526, 0.0
  %v13626 = vadd.f32 %v13624, %v13625
  %v13627 = vsel %vm6360, %v13527, 0.0
  %v13628 = vadd.f32 %v13626, %v13627
  %v13629 = vsel %vm6360, %v13528, 0.0
  %v13630 = vadd.f32 %v13628, %v13629
  %v13631 = vsel %vm6360, %v13529, 0.0
  %v13632 = vadd.f32 %v13630, %v13631
  %v13633 = vsel %vm6360, %v13530, 0.0
  %v13634 = vadd.f32 %v13632, %v13633
  %v13635 = vsel %vm6360, %v13531, 0.0
  %v13636 = vadd.f32 %v13634, %v13635
  %v13637 = vsel %vm6360, %v13532, 0.0
  %v13638 = vadd.f32 %v13636, %v13637
  %v13639 = vsel %vm6360, %v13533, 0.0
  %v13640 = vadd.f32 %v13638, %v13639
  %v13641 = vsel %vm6360, %v13534, 0.0
  %v13642 = vadd.f32 %v13640, %v13641
  %v13643 = vsel %vm6360, %v13535, 0.0
  %v13644 = vadd.f32 %v13642, %v13643
  %v13645 = vsel %vm6360, %v13536, 0.0
  %v13646 = vadd.f32 %v13644, %v13645
  %v13647 = vsel %vm6360, %v13537, 0.0
  %v13648 = vadd.f32 %v13646, %v13647
  %v13649 = vsel %vm6360, %v13538, 0.0
  %v13650 = vadd.f32 %v13648, %v13649
  %v13651 = vsel %vm6360, %v13539, 0.0
  %v13652 = vadd.f32 %v13650, %v13651
  %v13653 = vsel %vm6360, %v13540, 0.0
  %v13654 = vadd.f32 %v13652, %v13653
  %v13655 = vsel %vm6360, %v13541, 0.0
  %v13656 = vadd.f32 %v13654, %v13655
  %v13657 = vsel %vm6360, %v13542, 0.0
  %v13658 = vadd.f32 %v13656, %v13657
  %v13659 = vsel %vm6360, %v13543, 0.0
  %v13660 = vadd.f32 %v13658, %v13659
  %v13661 = vsel %vm6360, %v13544, 0.0
  %v13662 = vadd.f32 %v13660, %v13661
  %v13663 = vsel %vm6360, %v13545, 0.0
  %v13664 = vadd.f32 %v13662, %v13663
  %v13665 = vsel %vm6360, %v13546, 0.0
  %v13666 = vadd.f32 %v13664, %v13665
  %v13667 = vsel %vm6360, %v13547, 0.0
  %v13668 = vadd.f32 %v13666, %v13667
  %v13669 = vsel %vm6360, %v13548, 0.0
  %v13670 = vadd.f32 %v13668, %v13669
  %v13671 = vsel %vm6360, %v13549, 0.0
  %v13672 = vadd.f32 %v13670, %v13671
  %v13673 = vsel %vm6360, %v13550, 0.0
  %v13674 = vadd.f32 %v13672, %v13673
  %v13675 = vsel %vm6360, %v13551, 0.0
  %v13676 = vadd.f32 %v13674, %v13675
  %v13677 = vsel %vm6360, %v13552, 0.0
  %v13678 = vadd.f32 %v13676, %v13677
  %v13679 = vsel %vm6360, %v13553, 0.0
  %v13680 = vadd.f32 %v13678, %v13679
  %v13681 = vrot.slane %v13680, 4
  %v13682 = vadd.f32 %v13680, %v13681
  %v13683 = vrot.slane %v13682, 2
  %v13684 = vadd.f32 %v13682, %v13683
  %v13685 = vrot.slane %v13684, 1
  %v13686 = vadd.f32 %v13684, %v13685
  %v13687 = vmul.f32 %v13686, %v6494
  %v13688 = vmul.f32 %v13489, %v13489
  %v13689 = vsub.f32 %v13687, %v13688
  %v13690 = vadd.f32 %v13689, 1e-05
  %v13691 = vrsqrt.pop %v13690
  %v13692 = vmul.f32 %v24, %v13691
  %v13693 = vlaneseq
  %v13694 = vshrl.u32 %v13693, 7
  %v13695 = vsub.s32 0, %v13694
  %v13696 = vrot.slane %v13692, %v13695
  %v13697 = vmul.f32 %v13292, %v13696
  %v13698 = vmul.f32 %v13293, %v13696
  %v13699 = vmul.f32 %v13294, %v13696
  %v13700 = vmul.f32 %v13295, %v13696
  %v13701 = vmul.f32 %v13296, %v13696
  %v13702 = vmul.f32 %v13297, %v13696
  %v13703 = vmul.f32 %v13298, %v13696
  %v13704 = vmul.f32 %v13299, %v13696
  %v13705 = vmul.f32 %v13300, %v13696
  %v13706 = vmul.f32 %v13301, %v13696
  %v13707 = vmul.f32 %v13302, %v13696
  %v13708 = vmul.f32 %v13303, %v13696
  %v13709 = vmul.f32 %v13304, %v13696
  %v13710 = vmul.f32 %v13305, %v13696
  %v13711 = vmul.f32 %v13306, %v13696
  %v13712 = vmul.f32 %v13307, %v13696
  %v13713 = vmul.f32 %v13308, %v13696
  %v13714 = vmul.f32 %v13309, %v13696
  %v13715 = vmul.f32 %v13310, %v13696
  %v13716 = vmul.f32 %v13311, %v13696
  %v13717 = vmul.f32 %v13312, %v13696
  %v13718 = vmul.f32 %v13313, %v13696
  %v13719 = vmul.f32 %v13314, %v13696
  %v13720 = vmul.f32 %v13315, %v13696
  %v13721 = vmul.f32 %v13316, %v13696
  %v13722 = vmul.f32 %v13317, %v13696
  %v13723 = vmul.f32 %v13318, %v13696
  %v13724 = vmul.f32 %v13319, %v13696
  %v13725 = vmul.f32 %v13320, %v13696
  %v13726 = vmul.f32 %v13321, %v13696
  %v13727 = vmul.f32 %v13322, %v13696
  %v13728 = vmul.f32 %v13323, %v13696
  %v13729 = vmul.f32 %v13324, %v13696
  %v13730 = vmul.f32 %v13325, %v13696
  %v13731 = vmul.f32 %v13326, %v13696
  %v13732 = vmul.f32 %v13327, %v13696
  %v13733 = vmul.f32 %v13328, %v13696
  %v13734 = vmul.f32 %v13329, %v13696
  %v13735 = vmul.f32 %v13330, %v13696
  %v13736 = vmul.f32 %v13331, %v13696
  %v13737 = vmul.f32 %v13332, %v13696
  %v13738 = vmul.f32 %v13333, %v13696
  %v13739 = vmul.f32 %v13334, %v13696
  %v13740 = vmul.f32 %v13335, %v13696
  %v13741 = vmul.f32 %v13336, %v13696
  %v13742 = vmul.f32 %v13337, %v13696
  %v13743 = vmul.f32 %v13338, %v13696
  %v13744 = vmul.f32 %v13339, %v13696
  %v13745 = vmul.f32 %v13340, %v13696
  %v13746 = vmul.f32 %v13341, %v13696
  %v13747 = vmul.f32 %v13342, %v13696
  %v13748 = vmul.f32 %v13343, %v13696
  %v13749 = vmul.f32 %v13344, %v13696
  %v13750 = vmul.f32 %v13345, %v13696
  %v13751 = vmul.f32 %v13346, %v13696
  %v13752 = vmul.f32 %v13347, %v13696
  %v13753 = vmul.f32 %v13348, %v13696
  %v13754 = vmul.f32 %v13349, %v13696
  %v13755 = vmul.f32 %v13350, %v13696
  %v13756 = vmul.f32 %v13351, %v13696
  %v13757 = vmul.f32 %v13352, %v13696
  %v13758 = vmul.f32 %v13353, %v13696
  %v13759 = vmul.f32 %v13354, %v13696
  %v13760 = vmul.f32 %v13355, %v13696
  %v13761 = vmul.f32 %v13489, %v13692
  %v13762 = vsub.f32 %v25, %v13761
  %v13763 = vlaneseq
  %v13764 = vshrl.u32 %v13763, 7
  %v13765 = vsub.s32 0, %v13764
  %v13766 = vrot.slane %v13762, %v13765
  %v13767 = vadd.f32 %v13697, %v13766
  %v13768 = vadd.f32 %v13698, %v13766
  %v13769 = vadd.f32 %v13699, %v13766
  %v13770 = vadd.f32 %v13700, %v13766
  %v13771 = vadd.f32 %v13701, %v13766
  %v13772 = vadd.f32 %v13702, %v13766
  %v13773 = vadd.f32 %v13703, %v13766
  %v13774 = vadd.f32 %v13704, %v13766
  %v13775 = vadd.f32 %v13705, %v13766
  %v13776 = vadd.f32 %v13706, %v13766
  %v13777 = vadd.f32 %v13707, %v13766
  %v13778 = vadd.f32 %v13708, %v13766
  %v13779 = vadd.f32 %v13709, %v13766
  %v13780 = vadd.f32 %v13710, %v13766
  %v13781 = vadd.f32 %v13711, %v13766
  %v13782 = vadd.f32 %v13712, %v13766
  %v13783 = vadd.f32 %v13713, %v13766
  %v13784 = vadd.f32 %v13714, %v13766
  %v13785 = vadd.f32 %v13715, %v13766
  %v13786 = vadd.f32 %v13716, %v13766
  %v13787 = vadd.f32 %v13717, %v13766
  %v13788 = vadd.f32 %v13718, %v13766
  %v13789 = vadd.f32 %v13719, %v13766
  %v13790 = vadd.f32 %v13720, %v13766
  %v13791 = vadd.f32 %v13721, %v13766
  %v13792 = vadd.f32 %v13722, %v13766
  %v13793 = vadd.f32 %v13723, %v13766
  %v13794 = vadd.f32 %v13724, %v13766
  %v13795 = vadd.f32 %v13725, %v13766
  %v13796 = vadd.f32 %v13726, %v13766
  %v13797 = vadd.f32 %v13727, %v13766
  %v13798 = vadd.f32 %v13728, %v13766
  %v13799 = vadd.f32 %v13729, %v13766
  %v13800 = vadd.f32 %v13730, %v13766
  %v13801 = vadd.f32 %v13731, %v13766
  %v13802 = vadd.f32 %v13732, %v13766
  %v13803 = vadd.f32 %v13733, %v13766
  %v13804 = vadd.f32 %v13734, %v13766
  %v13805 = vadd.f32 %v13735, %v13766
  %v13806 = vadd.f32 %v13736, %v13766
  %v13807 = vadd.f32 %v13737, %v13766
  %v13808 = vadd.f32 %v13738, %v13766
  %v13809 = vadd.f32 %v13739, %v13766
  %v13810 = vadd.f32 %v13740, %v13766
  %v13811 = vadd.f32 %v13741, %v13766
  %v13812 = vadd.f32 %v13742, %v13766
  %v13813 = vadd.f32 %v13743, %v13766
  %v13814 = vadd.f32 %v13744, %v13766
  %v13815 = vadd.f32 %v13745, %v13766
  %v13816 = vadd.f32 %v13746, %v13766
  %v13817 = vadd.f32 %v13747, %v13766
  %v13818 = vadd.f32 %v13748, %v13766
  %v13819 = vadd.f32 %v13749, %v13766
  %v13820 = vadd.f32 %v13750, %v13766
  %v13821 = vadd.f32 %v13751, %v13766
  %v13822 = vadd.f32 %v13752, %v13766
  %v13823 = vadd.f32 %v13753, %v13766
  %v13824 = vadd.f32 %v13754, %v13766
  %v13825 = vadd.f32 %v13755, %v13766
  %v13826 = vadd.f32 %v13756, %v13766
  %v13827 = vadd.f32 %v13757, %v13766
  %v13828 = vadd.f32 %v13758, %v13766
  %v13829 = vadd.f32 %v13759, %v13766
  %v13830 = vadd.f32 %v13760, %v13766
  %v13831 = vld [vmem:[%s3] sm:$0xf]
  %v13832 = vlaneseq
  %v13833 = vshrl.u32 %v13832, 7
  %v13834 = vsub.s32 0, %v13833
  %v13835 = vrot.slane %v26, %v13834
  %v13837 = vsel %vm351, %v13831, 0
  %13839 = vmatprep.subr.mxu0 0.0
  %13840 = vmatpush1.msra.mxu0 0.0
  %13841 = vmatprep.subr.mxu0 0.0
  %13842 = vmatpush1.msra.mxu0 0.0
  %13843 = vmatprep.subr.mxu0 0.0
  %13844 = vmatpush1.msra.mxu0 0.0
  %13845 = vmatprep.subr.mxu0 0.0
  %13846 = vmatpush1.msra.mxu0 0.0
  %13847 = vmatprep.subr.mxu0 0.0
  %13848 = vmatpush1.msra.mxu0 0.0
  %13849 = vmatprep.subr.mxu0 0.0
  %13850 = vmatpush1.msra.mxu0 0.0
  %13851 = vmatprep.subr.mxu0 0.0
  %13852 = vmatpush1.msra.mxu0 0.0
  %13853 = vmatprep.subr.mxu0 0.0
  %13854 = vmatpush1.msra.mxu0 0.0
  %13855 = vmatprep.subr.mxu0 0.0
  %13856 = vmatpush1.msra.mxu0 0.0
  %13857 = vmatprep.subr.mxu0 0.0
  %13858 = vmatpush1.msra.mxu0 0.0
  %13859 = vmatprep.subr.mxu0 0.0
  %13860 = vmatpush1.msra.mxu0 0.0
  %13861 = vmatprep.subr.mxu0 0.0
  %13862 = vmatpush1.msra.mxu0 0.0
  %13863 = vmatprep.subr.mxu0 0.0
  %13864 = vmatpush1.msra.mxu0 0.0
  %13865 = vmatprep.subr.mxu0 0.0
  %13866 = vmatpush1.msra.mxu0 0.0
  %13867 = vmatprep.subr.mxu0 0.0
  %13868 = vmatpush1.msra.mxu0 0.0
  %13869 = vmatprep.subr.mxu0 0.0
  %13870 = vmatpush1.msra.mxu0 %v13837
  %13871 = vmatprep.subr.mxu0 0.0
  %13872 = vmatpush2.msra.mxu0 0.0
  %13873 = vmatprep.subr.mxu0 0.0
  %13874 = vmatpush2.msra.mxu0 0.0
  %13875 = vmatprep.subr.mxu0 0.0
  %13876 = vmatpush2.msra.mxu0 0.0
  %13877 = vmatprep.subr.mxu0 0.0
  %13878 = vmatpush2.msra.mxu0 0.0
  %13879 = vmatprep.subr.mxu0 0.0
  %13880 = vmatpush2.msra.mxu0 0.0
  %13881 = vmatprep.subr.mxu0 0.0
  %13882 = vmatpush2.msra.mxu0 0.0
  %13883 = vmatprep.subr.mxu0 0.0
  %13884 = vmatpush2.msra.mxu0 0.0
  %13885 = vmatprep.subr.mxu0 0.0
  %13886 = vmatpush2.msra.mxu0 0.0
  %13887 = vmatprep.subr.mxu0 0.0
  %13888 = vmatpush2.msra.mxu0 0.0
  %13889 = vmatprep.subr.mxu0 0.0
  %13890 = vmatpush2.msra.mxu0 0.0
  %13891 = vmatprep.subr.mxu0 0.0
  %13892 = vmatpush2.msra.mxu0 0.0
  %13893 = vmatprep.subr.mxu0 0.0
  %13894 = vmatpush2.msra.mxu0 0.0
  %13895 = vmatprep.subr.mxu0 0.0
  %13896 = vmatpush2.msra.mxu0 0.0
  %13897 = vmatprep.subr.mxu0 0.0
  %13898 = vmatpush2.msra.mxu0 0.0
  %13899 = vmatprep.subr.mxu0 0.0
  %13900 = vmatpush2.msra.mxu0 0.0
  %13901 = vmatprep.subr.mxu0 0.0
  %13902 = vmatpush2.msra.mxu0 0.0
  %13903 = vmatprep.mubr.f32.mxu0 0.0
  %13904 = vmatmul.mubr.f32.gmra.mxu0 %v2808
  %v13905 = vpop.f32.mrf.mxu0
  %v13906 = vadd.f32 %v13835, %v13905
  %v13907 = vpop.f32.mrf.mxu0
  %13908 = vmatprep.mubr.f32.mxu0 0.0
  %13909 = vmatmul.mubr.f32.gmra.mxu0 %v2811
  %v13910 = vpop.f32.mrf.mxu0
  %v13911 = vadd.f32 %v13835, %v13910
  %v13912 = vpop.f32.mrf.mxu0
  %13913 = vmatprep.mubr.f32.mxu0 0.0
  %13914 = vmatmul.mubr.f32.gmra.mxu0 %v2814
  %v13915 = vpop.f32.mrf.mxu0
  %v13916 = vadd.f32 %v13835, %v13915
  %v13917 = vpop.f32.mrf.mxu0
  %13918 = vmatprep.mubr.f32.mxu0 0.0
  %13919 = vmatmul.mubr.f32.gmra.mxu0 %v2817
  %v13920 = vpop.f32.mrf.mxu0
  %v13921 = vadd.f32 %v13835, %v13920
  %v13922 = vpop.f32.mrf.mxu0
  %13923 = vmatprep.mubr.f32.mxu0 0.0
  %13924 = vmatmul.mubr.f32.gmra.mxu0 %v2820
  %v13925 = vpop.f32.mrf.mxu0
  %v13926 = vadd.f32 %v13835, %v13925
  %v13927 = vpop.f32.mrf.mxu0
  %13928 = vmatprep.mubr.f32.mxu0 0.0
  %13929 = vmatmul.mubr.f32.gmra.mxu0 %v2823
  %v13930 = vpop.f32.mrf.mxu0
  %v13931 = vadd.f32 %v13835, %v13930
  %v13932 = vpop.f32.mrf.mxu0
  %13933 = vmatprep.mubr.f32.mxu0 0.0
  %13934 = vmatmul.mubr.f32.gmra.mxu0 %v2826
  %v13935 = vpop.f32.mrf.mxu0
  %v13936 = vadd.f32 %v13835, %v13935
  %v13937 = vpop.f32.mrf.mxu0
  %13938 = vmatprep.mubr.f32.mxu0 0.0
  %13939 = vmatmul.mubr.f32.gmra.mxu0 %v2829
  %v13940 = vpop.f32.mrf.mxu0
  %v13941 = vadd.f32 %v13835, %v13940
  %v13942 = vpop.f32.mrf.mxu0
  %13943 = vmatprep.mubr.f32.mxu0 0.0
  %13944 = vmatmul.mubr.f32.gmra.mxu0 %v2832
  %v13945 = vpop.f32.mrf.mxu0
  %v13946 = vadd.f32 %v13835, %v13945
  %v13947 = vpop.f32.mrf.mxu0
  %13948 = vmatprep.mubr.f32.mxu0 0.0
  %13949 = vmatmul.mubr.f32.gmra.mxu0 %v2835
  %v13950 = vpop.f32.mrf.mxu0
  %v13951 = vadd.f32 %v13835, %v13950
  %v13952 = vpop.f32.mrf.mxu0
  %13953 = vmatprep.mubr.f32.mxu0 0.0
  %13954 = vmatmul.mubr.f32.gmra.mxu0 %v2838
  %v13955 = vpop.f32.mrf.mxu0
  %v13956 = vadd.f32 %v13835, %v13955
  %v13957 = vpop.f32.mrf.mxu0
  %13958 = vmatprep.mubr.f32.mxu0 0.0
  %13959 = vmatmul.mubr.f32.gmra.mxu0 %v2841
  %v13960 = vpop.f32.mrf.mxu0
  %v13961 = vadd.f32 %v13835, %v13960
  %v13962 = vpop.f32.mrf.mxu0
  %13963 = vmatprep.mubr.f32.mxu0 0.0
  %13964 = vmatmul.mubr.f32.gmra.mxu0 %v2844
  %v13965 = vpop.f32.mrf.mxu0
  %v13966 = vadd.f32 %v13835, %v13965
  %v13967 = vpop.f32.mrf.mxu0
  %13968 = vmatprep.mubr.f32.mxu0 0.0
  %13969 = vmatmul.mubr.f32.gmra.mxu0 %v2847
  %v13970 = vpop.f32.mrf.mxu0
  %v13971 = vadd.f32 %v13835, %v13970
  %v13972 = vpop.f32.mrf.mxu0
  %13973 = vmatprep.mubr.f32.mxu0 0.0
  %13974 = vmatmul.mubr.f32.gmra.mxu0 %v2850
  %v13975 = vpop.f32.mrf.mxu0
  %v13976 = vadd.f32 %v13835, %v13975
  %v13977 = vpop.f32.mrf.mxu0
  %13978 = vmatprep.mubr.f32.mxu0 0.0
  %13979 = vmatmul.mubr.f32.gmra.mxu0 %v2853
  %v13980 = vpop.f32.mrf.mxu0
  %v13981 = vadd.f32 %v13835, %v13980
  %v13982 = vpop.f32.mrf.mxu0
  %13983 = vmatprep.mubr.f32.mxu0 0.0
  %13984 = vmatmul.mubr.f32.gmra.mxu0 %v2856
  %v13985 = vpop.f32.mrf.mxu0
  %v13986 = vadd.f32 %v13835, %v13985
  %v13987 = vpop.f32.mrf.mxu0
  %13988 = vmatprep.mubr.f32.mxu0 0.0
  %13989 = vmatmul.mubr.f32.gmra.mxu0 %v2859
  %v13990 = vpop.f32.mrf.mxu0
  %v13991 = vadd.f32 %v13835, %v13990
  %v13992 = vpop.f32.mrf.mxu0
  %13993 = vmatprep.mubr.f32.mxu0 0.0
  %13994 = vmatmul.mubr.f32.gmra.mxu0 %v2862
  %v13995 = vpop.f32.mrf.mxu0
  %v13996 = vadd.f32 %v13835, %v13995
  %v13997 = vpop.f32.mrf.mxu0
  %13998 = vmatprep.mubr.f32.mxu0 0.0
  %13999 = vmatmul.mubr.f32.gmra.mxu0 %v2865
  %v14000 = vpop.f32.mrf.mxu0
  %v14001 = vadd.f32 %v13835, %v14000
  %v14002 = vpop.f32.mrf.mxu0
  %14003 = vmatprep.mubr.f32.mxu0 0.0
  %14004 = vmatmul.mubr.f32.gmra.mxu0 %v2868
  %v14005 = vpop.f32.mrf.mxu0
  %v14006 = vadd.f32 %v13835, %v14005
  %v14007 = vpop.f32.mrf.mxu0
  %14008 = vmatprep.mubr.f32.mxu0 0.0
  %14009 = vmatmul.mubr.f32.gmra.mxu0 %v2871
  %v14010 = vpop.f32.mrf.mxu0
  %v14011 = vadd.f32 %v13835, %v14010
  %v14012 = vpop.f32.mrf.mxu0
  %14013 = vmatprep.mubr.f32.mxu0 0.0
  %14014 = vmatmul.mubr.f32.gmra.mxu0 %v2874
  %v14015 = vpop.f32.mrf.mxu0
  %v14016 = vadd.f32 %v13835, %v14015
  %v14017 = vpop.f32.mrf.mxu0
  %14018 = vmatprep.mubr.f32.mxu0 0.0
  %14019 = vmatmul.mubr.f32.gmra.mxu0 %v2877
  %v14020 = vpop.f32.mrf.mxu0
  %v14021 = vadd.f32 %v13835, %v14020
  %v14022 = vpop.f32.mrf.mxu0
  %14023 = vmatprep.mubr.f32.mxu0 0.0
  %14024 = vmatmul.mubr.f32.gmra.mxu0 %v2880
  %v14025 = vpop.f32.mrf.mxu0
  %v14026 = vadd.f32 %v13835, %v14025
  %v14027 = vpop.f32.mrf.mxu0
  %14028 = vmatprep.mubr.f32.mxu0 0.0
  %14029 = vmatmul.mubr.f32.gmra.mxu0 %v2883
  %v14030 = vpop.f32.mrf.mxu0
  %v14031 = vadd.f32 %v13835, %v14030
  %v14032 = vpop.f32.mrf.mxu0
  %14033 = vmatprep.mubr.f32.mxu0 0.0
  %14034 = vmatmul.mubr.f32.gmra.mxu0 %v2886
  %v14035 = vpop.f32.mrf.mxu0
  %v14036 = vadd.f32 %v13835, %v14035
  %v14037 = vpop.f32.mrf.mxu0
  %14038 = vmatprep.mubr.f32.mxu0 0.0
  %14039 = vmatmul.mubr.f32.gmra.mxu0 %v2889
  %v14040 = vpop.f32.mrf.mxu0
  %v14041 = vadd.f32 %v13835, %v14040
  %v14042 = vpop.f32.mrf.mxu0
  %14043 = vmatprep.mubr.f32.mxu0 0.0
  %14044 = vmatmul.mubr.f32.gmra.mxu0 %v2892
  %v14045 = vpop.f32.mrf.mxu0
  %v14046 = vadd.f32 %v13835, %v14045
  %v14047 = vpop.f32.mrf.mxu0
  %14048 = vmatprep.mubr.f32.mxu0 0.0
  %14049 = vmatmul.mubr.f32.gmra.mxu0 %v2895
  %v14050 = vpop.f32.mrf.mxu0
  %v14051 = vadd.f32 %v13835, %v14050
  %v14052 = vpop.f32.mrf.mxu0
  %14053 = vmatprep.mubr.f32.mxu0 0.0
  %14054 = vmatmul.mubr.f32.gmra.mxu0 %v2898
  %v14055 = vpop.f32.mrf.mxu0
  %v14056 = vadd.f32 %v13835, %v14055
  %v14057 = vpop.f32.mrf.mxu0
  %14058 = vmatprep.mubr.f32.mxu0 0.0
  %14059 = vmatmul.mubr.f32.gmra.mxu0 %v2901
  %v14060 = vpop.f32.mrf.mxu0
  %v14061 = vadd.f32 %v13835, %v14060
  %v14062 = vpop.f32.mrf.mxu0
  %14063 = vmatprep.mubr.f32.mxu0 0.0
  %14064 = vmatmul.mubr.f32.gmra.mxu0 %v2904
  %v14065 = vpop.f32.mrf.mxu0
  %v14066 = vadd.f32 %v13835, %v14065
  %v14067 = vpop.f32.mrf.mxu0
  %14068 = vmatprep.mubr.f32.mxu0 0.0
  %14069 = vmatmul.mubr.f32.gmra.mxu0 %v2907
  %v14070 = vpop.f32.mrf.mxu0
  %v14071 = vadd.f32 %v13835, %v14070
  %v14072 = vpop.f32.mrf.mxu0
  %14073 = vmatprep.mubr.f32.mxu0 0.0
  %14074 = vmatmul.mubr.f32.gmra.mxu0 %v2910
  %v14075 = vpop.f32.mrf.mxu0
  %v14076 = vadd.f32 %v13835, %v14075
  %v14077 = vpop.f32.mrf.mxu0
  %14078 = vmatprep.mubr.f32.mxu0 0.0
  %14079 = vmatmul.mubr.f32.gmra.mxu0 %v2913
  %v14080 = vpop.f32.mrf.mxu0
  %v14081 = vadd.f32 %v13835, %v14080
  %v14082 = vpop.f32.mrf.mxu0
  %14083 = vmatprep.mubr.f32.mxu0 0.0
  %14084 = vmatmul.mubr.f32.gmra.mxu0 %v2916
  %v14085 = vpop.f32.mrf.mxu0
  %v14086 = vadd.f32 %v13835, %v14085
  %v14087 = vpop.f32.mrf.mxu0
  %14088 = vmatprep.mubr.f32.mxu0 0.0
  %14089 = vmatmul.mubr.f32.gmra.mxu0 %v2919
  %v14090 = vpop.f32.mrf.mxu0
  %v14091 = vadd.f32 %v13835, %v14090
  %v14092 = vpop.f32.mrf.mxu0
  %14093 = vmatprep.mubr.f32.mxu0 0.0
  %14094 = vmatmul.mubr.f32.gmra.mxu0 %v2922
  %v14095 = vpop.f32.mrf.mxu0
  %v14096 = vadd.f32 %v13835, %v14095
  %v14097 = vpop.f32.mrf.mxu0
  %14098 = vmatprep.mubr.f32.mxu0 0.0
  %14099 = vmatmul.mubr.f32.gmra.mxu0 %v2925
  %v14100 = vpop.f32.mrf.mxu0
  %v14101 = vadd.f32 %v13835, %v14100
  %v14102 = vpop.f32.mrf.mxu0
  %14103 = vmatprep.mubr.f32.mxu0 0.0
  %14104 = vmatmul.mubr.f32.gmra.mxu0 %v2928
  %v14105 = vpop.f32.mrf.mxu0
  %v14106 = vadd.f32 %v13835, %v14105
  %v14107 = vpop.f32.mrf.mxu0
  %14108 = vmatprep.mubr.f32.mxu0 0.0
  %14109 = vmatmul.mubr.f32.gmra.mxu0 %v2931
  %v14110 = vpop.f32.mrf.mxu0
  %v14111 = vadd.f32 %v13835, %v14110
  %v14112 = vpop.f32.mrf.mxu0
  %14113 = vmatprep.mubr.f32.mxu0 0.0
  %14114 = vmatmul.mubr.f32.gmra.mxu0 %v2934
  %v14115 = vpop.f32.mrf.mxu0
  %v14116 = vadd.f32 %v13835, %v14115
  %v14117 = vpop.f32.mrf.mxu0
  %14118 = vmatprep.mubr.f32.mxu0 0.0
  %14119 = vmatmul.mubr.f32.gmra.mxu0 %v2937
  %v14120 = vpop.f32.mrf.mxu0
  %v14121 = vadd.f32 %v13835, %v14120
  %v14122 = vpop.f32.mrf.mxu0
  %14123 = vmatprep.mubr.f32.mxu0 0.0
  %14124 = vmatmul.mubr.f32.gmra.mxu0 %v2940
  %v14125 = vpop.f32.mrf.mxu0
  %v14126 = vadd.f32 %v13835, %v14125
  %v14127 = vpop.f32.mrf.mxu0
  %14128 = vmatprep.mubr.f32.mxu0 0.0
  %14129 = vmatmul.mubr.f32.gmra.mxu0 %v2943
  %v14130 = vpop.f32.mrf.mxu0
  %v14131 = vadd.f32 %v13835, %v14130
  %v14132 = vpop.f32.mrf.mxu0
  %14133 = vmatprep.mubr.f32.mxu0 0.0
  %14134 = vmatmul.mubr.f32.gmra.mxu0 %v2946
  %v14135 = vpop.f32.mrf.mxu0
  %v14136 = vadd.f32 %v13835, %v14135
  %v14137 = vpop.f32.mrf.mxu0
  %14138 = vmatprep.mubr.f32.mxu0 0.0
  %14139 = vmatmul.mubr.f32.gmra.mxu0 %v2949
  %v14140 = vpop.f32.mrf.mxu0
  %v14141 = vadd.f32 %v13835, %v14140
  %v14142 = vpop.f32.mrf.mxu0
  %14143 = vmatprep.mubr.f32.mxu0 0.0
  %14144 = vmatmul.mubr.f32.gmra.mxu0 %v2952
  %v14145 = vpop.f32.mrf.mxu0
  %v14146 = vadd.f32 %v13835, %v14145
  %v14147 = vpop.f32.mrf.mxu0
  %14148 = vmatprep.mubr.f32.mxu0 0.0
  %14149 = vmatmul.mubr.f32.gmra.mxu0 %v2955
  %v14150 = vpop.f32.mrf.mxu0
  %v14151 = vadd.f32 %v13835, %v14150
  %v14152 = vpop.f32.mrf.mxu0
  %14153 = vmatprep.mubr.f32.mxu0 0.0
  %14154 = vmatmul.mubr.f32.gmra.mxu0 %v2958
  %v14155 = vpop.f32.mrf.mxu0
  %v14156 = vadd.f32 %v13835, %v14155
  %v14157 = vpop.f32.mrf.mxu0
  %14158 = vmatprep.mubr.f32.mxu0 0.0
  %14159 = vmatmul.mubr.f32.gmra.mxu0 %v2961
  %v14160 = vpop.f32.mrf.mxu0
  %v14161 = vadd.f32 %v13835, %v14160
  %v14162 = vpop.f32.mrf.mxu0
  %14163 = vmatprep.mubr.f32.mxu0 0.0
  %14164 = vmatmul.mubr.f32.gmra.mxu0 %v2964
  %v14165 = vpop.f32.mrf.mxu0
  %v14166 = vadd.f32 %v13835, %v14165
  %v14167 = vpop.f32.mrf.mxu0
  %14168 = vmatprep.mubr.f32.mxu0 0.0
  %14169 = vmatmul.mubr.f32.gmra.mxu0 %v2967
  %v14170 = vpop.f32.mrf.mxu0
  %v14171 = vadd.f32 %v13835, %v14170
  %v14172 = vpop.f32.mrf.mxu0
  %14173 = vmatprep.mubr.f32.mxu0 0.0
  %14174 = vmatmul.mubr.f32.gmra.mxu0 %v2970
  %v14175 = vpop.f32.mrf.mxu0
  %v14176 = vadd.f32 %v13835, %v14175
  %v14177 = vpop.f32.mrf.mxu0
  %14178 = vmatprep.mubr.f32.mxu0 0.0
  %14179 = vmatmul.mubr.f32.gmra.mxu0 %v2973
  %v14180 = vpop.f32.mrf.mxu0
  %v14181 = vadd.f32 %v13835, %v14180
  %v14182 = vpop.f32.mrf.mxu0
  %14183 = vmatprep.mubr.f32.mxu0 0.0
  %14184 = vmatmul.mubr.f32.gmra.mxu0 %v2976
  %v14185 = vpop.f32.mrf.mxu0
  %v14186 = vadd.f32 %v13835, %v14185
  %v14187 = vpop.f32.mrf.mxu0
  %14188 = vmatprep.mubr.f32.mxu0 0.0
  %14189 = vmatmul.mubr.f32.gmra.mxu0 %v2979
  %v14190 = vpop.f32.mrf.mxu0
  %v14191 = vadd.f32 %v13835, %v14190
  %v14192 = vpop.f32.mrf.mxu0
  %14193 = vmatprep.mubr.f32.mxu0 0.0
  %14194 = vmatmul.mubr.f32.gmra.mxu0 %v2982
  %v14195 = vpop.f32.mrf.mxu0
  %v14196 = vadd.f32 %v13835, %v14195
  %v14197 = vpop.f32.mrf.mxu0
  %14198 = vmatprep.mubr.f32.mxu0 0.0
  %14199 = vmatmul.mubr.f32.gmra.mxu0 %v2985
  %v14200 = vpop.f32.mrf.mxu0
  %v14201 = vadd.f32 %v13835, %v14200
  %v14202 = vpop.f32.mrf.mxu0
  %14203 = vmatprep.mubr.f32.mxu0 0.0
  %14204 = vmatmul.mubr.f32.gmra.mxu0 %v2988
  %v14205 = vpop.f32.mrf.mxu0
  %v14206 = vadd.f32 %v13835, %v14205
  %v14207 = vpop.f32.mrf.mxu0
  %14208 = vmatprep.mubr.f32.mxu0 0.0
  %14209 = vmatmul.mubr.f32.gmra.mxu0 %v2991
  %v14210 = vpop.f32.mrf.mxu0
  %v14211 = vadd.f32 %v13835, %v14210
  %v14212 = vpop.f32.mrf.mxu0
  %14213 = vmatprep.mubr.f32.mxu0 0.0
  %14214 = vmatmul.mubr.f32.gmra.mxu0 %v2994
  %v14215 = vpop.f32.mrf.mxu0
  %v14216 = vadd.f32 %v13835, %v14215
  %v14217 = vpop.f32.mrf.mxu0
  %14218 = vmatprep.mubr.f32.mxu0 0.0
  %14219 = vmatmul.mubr.f32.gmra.mxu0 %v2997
  %v14220 = vpop.f32.mrf.mxu0
  %v14221 = vadd.f32 %v13835, %v14220
  %v14222 = vpop.f32.mrf.mxu0
  %14223 = vdwg.mxu0
  %v14224 = vadd.f32 %v13767, %v13906
  %v14225 = vadd.f32 %v13768, %v13911
  %v14226 = vadd.f32 %v13769, %v13916
  %v14227 = vadd.f32 %v13770, %v13921
  %v14228 = vadd.f32 %v13771, %v13926
  %v14229 = vadd.f32 %v13772, %v13931
  %v14230 = vadd.f32 %v13773, %v13936
  %v14231 = vadd.f32 %v13774, %v13941
  %v14232 = vadd.f32 %v13775, %v13946
  %v14233 = vadd.f32 %v13776, %v13951
  %v14234 = vadd.f32 %v13777, %v13956
  %v14235 = vadd.f32 %v13778, %v13961
  %v14236 = vadd.f32 %v13779, %v13966
  %v14237 = vadd.f32 %v13780, %v13971
  %v14238 = vadd.f32 %v13781, %v13976
  %v14239 = vadd.f32 %v13782, %v13981
  %v14240 = vadd.f32 %v13783, %v13986
  %v14241 = vadd.f32 %v13784, %v13991
  %v14242 = vadd.f32 %v13785, %v13996
  %v14243 = vadd.f32 %v13786, %v14001
  %v14244 = vadd.f32 %v13787, %v14006
  %v14245 = vadd.f32 %v13788, %v14011
  %v14246 = vadd.f32 %v13789, %v14016
  %v14247 = vadd.f32 %v13790, %v14021
  %v14248 = vadd.f32 %v13791, %v14026
  %v14249 = vadd.f32 %v13792, %v14031
  %v14250 = vadd.f32 %v13793, %v14036
  %v14251 = vadd.f32 %v13794, %v14041
  %v14252 = vadd.f32 %v13795, %v14046
  %v14253 = vadd.f32 %v13796, %v14051
  %v14254 = vadd.f32 %v13797, %v14056
  %v14255 = vadd.f32 %v13798, %v14061
  %v14256 = vadd.f32 %v13799, %v14066
  %v14257 = vadd.f32 %v13800, %v14071
  %v14258 = vadd.f32 %v13801, %v14076
  %v14259 = vadd.f32 %v13802, %v14081
  %v14260 = vadd.f32 %v13803, %v14086
  %v14261 = vadd.f32 %v13804, %v14091
  %v14262 = vadd.f32 %v13805, %v14096
  %v14263 = vadd.f32 %v13806, %v14101
  %v14264 = vadd.f32 %v13807, %v14106
  %v14265 = vadd.f32 %v13808, %v14111
  %v14266 = vadd.f32 %v13809, %v14116
  %v14267 = vadd.f32 %v13810, %v14121
  %v14268 = vadd.f32 %v13811, %v14126
  %v14269 = vadd.f32 %v13812, %v14131
  %v14270 = vadd.f32 %v13813, %v14136
  %v14271 = vadd.f32 %v13814, %v14141
  %v14272 = vadd.f32 %v13815, %v14146
  %v14273 = vadd.f32 %v13816, %v14151
  %v14274 = vadd.f32 %v13817, %v14156
  %v14275 = vadd.f32 %v13818, %v14161
  %v14276 = vadd.f32 %v13819, %v14166
  %v14277 = vadd.f32 %v13820, %v14171
  %v14278 = vadd.f32 %v13821, %v14176
  %v14279 = vadd.f32 %v13822, %v14181
  %v14280 = vadd.f32 %v13823, %v14186
  %v14281 = vadd.f32 %v13824, %v14191
  %v14282 = vadd.f32 %v13825, %v14196
  %v14283 = vadd.f32 %v13826, %v14201
  %v14284 = vadd.f32 %v13827, %v14206
  %v14285 = vadd.f32 %v13828, %v14211
  %v14286 = vadd.f32 %v13829, %v14216
  %v14287 = vadd.f32 %v13830, %v14221
  %v14288 = vmax.f32 %v14224, 0.0
  %v14289 = vmax.f32 %v14225, 0.0
  %v14290 = vmax.f32 %v14226, 0.0
  %v14291 = vmax.f32 %v14227, 0.0
  %v14292 = vmax.f32 %v14228, 0.0
  %v14293 = vmax.f32 %v14229, 0.0
  %v14294 = vmax.f32 %v14230, 0.0
  %v14295 = vmax.f32 %v14231, 0.0
  %v14296 = vmax.f32 %v14232, 0.0
  %v14297 = vmax.f32 %v14233, 0.0
  %v14298 = vmax.f32 %v14234, 0.0
  %v14299 = vmax.f32 %v14235, 0.0
  %v14300 = vmax.f32 %v14236, 0.0
  %v14301 = vmax.f32 %v14237, 0.0
  %v14302 = vmax.f32 %v14238, 0.0
  %v14303 = vmax.f32 %v14239, 0.0
  %v14304 = vmax.f32 %v14240, 0.0
  %v14305 = vmax.f32 %v14241, 0.0
  %v14306 = vmax.f32 %v14242, 0.0
  %v14307 = vmax.f32 %v14243, 0.0
  %v14308 = vmax.f32 %v14244, 0.0
  %v14309 = vmax.f32 %v14245, 0.0
  %v14310 = vmax.f32 %v14246, 0.0
  %v14311 = vmax.f32 %v14247, 0.0
  %v14312 = vmax.f32 %v14248, 0.0
  %v14313 = vmax.f32 %v14249, 0.0
  %v14314 = vmax.f32 %v14250, 0.0
  %v14315 = vmax.f32 %v14251, 0.0
  %v14316 = vmax.f32 %v14252, 0.0
  %v14317 = vmax.f32 %v14253, 0.0
  %v14318 = vmax.f32 %v14254, 0.0
  %v14319 = vmax.f32 %v14255, 0.0
  %v14320 = vmax.f32 %v14256, 0.0
  %v14321 = vmax.f32 %v14257, 0.0
  %v14322 = vmax.f32 %v14258, 0.0
  %v14323 = vmax.f32 %v14259, 0.0
  %v14324 = vmax.f32 %v14260, 0.0
  %v14325 = vmax.f32 %v14261, 0.0
  %v14326 = vmax.f32 %v14262, 0.0
  %v14327 = vmax.f32 %v14263, 0.0
  %v14328 = vmax.f32 %v14264, 0.0
  %v14329 = vmax.f32 %v14265, 0.0
  %v14330 = vmax.f32 %v14266, 0.0
  %v14331 = vmax.f32 %v14267, 0.0
  %v14332 = vmax.f32 %v14268, 0.0
  %v14333 = vmax.f32 %v14269, 0.0
  %v14334 = vmax.f32 %v14270, 0.0
  %v14335 = vmax.f32 %v14271, 0.0
  %v14336 = vmax.f32 %v14272, 0.0
  %v14337 = vmax.f32 %v14273, 0.0
  %v14338 = vmax.f32 %v14274, 0.0
  %v14339 = vmax.f32 %v14275, 0.0
  %v14340 = vmax.f32 %v14276, 0.0
  %v14341 = vmax.f32 %v14277, 0.0
  %v14342 = vmax.f32 %v14278, 0.0
  %v14343 = vmax.f32 %v14279, 0.0
  %v14344 = vmax.f32 %v14280, 0.0
  %v14345 = vmax.f32 %v14281, 0.0
  %v14346 = vmax.f32 %v14282, 0.0
  %v14347 = vmax.f32 %v14283, 0.0
  %v14348 = vmax.f32 %v14284, 0.0
  %v14349 = vmax.f32 %v14285, 0.0
  %v14350 = vmax.f32 %v14286, 0.0
  %v14351 = vmax.f32 %v14287, 0.0
  %14352 = vst.msk [vmem:[%s5] sm:$0xff] %vm6360, %v14288
  %14353 = vst.msk [vmem:[%s5 + $0x8] sm:$0xff] %vm6360, %v14289
  %14354 = vst.msk [vmem:[%s5 + $0x10] sm:$0xff] %vm6360, %v14290
  %14355 = vst.msk [vmem:[%s5 + $0x18] sm:$0xff] %vm6360, %v14291
  %14356 = vst.msk [vmem:[%s5 + $0x20] sm:$0xff] %vm6360, %v14292
  %14357 = vst.msk [vmem:[%s5 + $0x28] sm:$0xff] %vm6360, %v14293
  %14358 = vst.msk [vmem:[%s5 + $0x30] sm:$0xff] %vm6360, %v14294
  %14359 = vst.msk [vmem:[%s5 + $0x38] sm:$0xff] %vm6360, %v14295
  %14360 = vst.msk [vmem:[%s5 + $0x40] sm:$0xff] %vm6360, %v14296
  %14361 = vst.msk [vmem:[%s5 + $0x48] sm:$0xff] %vm6360, %v14297
  %14362 = vst.msk [vmem:[%s5 + $0x50] sm:$0xff] %vm6360, %v14298
  %14363 = vst.msk [vmem:[%s5 + $0x58] sm:$0xff] %vm6360, %v14299
  %14364 = vst.msk [vmem:[%s5 + $0x60] sm:$0xff] %vm6360, %v14300
  %14365 = vst.msk [vmem:[%s5 + $0x68] sm:$0xff] %vm6360, %v14301
  %14366 = vst.msk [vmem:[%s5 + $0x70] sm:$0xff] %vm6360, %v14302
  %14367 = vst.msk [vmem:[%s5 + $0x78] sm:$0xff] %vm6360, %v14303
  %14368 = vst.msk [vmem:[%s5 + $0x80] sm:$0xff] %vm6360, %v14304
  %14369 = vst.msk [vmem:[%s5 + $0x88] sm:$0xff] %vm6360, %v14305
  %14370 = vst.msk [vmem:[%s5 + $0x90] sm:$0xff] %vm6360, %v14306
  %14371 = vst.msk [vmem:[%s5 + $0x98] sm:$0xff] %vm6360, %v14307
  %14372 = vst.msk [vmem:[%s5 + $0xa0] sm:$0xff] %vm6360, %v14308
  %14373 = vst.msk [vmem:[%s5 + $0xa8] sm:$0xff] %vm6360, %v14309
  %14374 = vst.msk [vmem:[%s5 + $0xb0] sm:$0xff] %vm6360, %v14310
  %14375 = vst.msk [vmem:[%s5 + $0xb8] sm:$0xff] %vm6360, %v14311
  %14376 = vst.msk [vmem:[%s5 + $0xc0] sm:$0xff] %vm6360, %v14312
  %14377 = vst.msk [vmem:[%s5 + $0xc8] sm:$0xff] %vm6360, %v14313
  %14378 = vst.msk [vmem:[%s5 + $0xd0] sm:$0xff] %vm6360, %v14314
  %14379 = vst.msk [vmem:[%s5 + $0xd8] sm:$0xff] %vm6360, %v14315
  %14380 = vst.msk [vmem:[%s5 + $0xe0] sm:$0xff] %vm6360, %v14316
  %14381 = vst.msk [vmem:[%s5 + $0xe8] sm:$0xff] %vm6360, %v14317
  %14382 = vst.msk [vmem:[%s5 + $0xf0] sm:$0xff] %vm6360, %v14318
  %14383 = vst.msk [vmem:[%s5 + $0xf8] sm:$0xff] %vm6360, %v14319
  %14384 = vst.msk [vmem:[%s5 + $0x100] sm:$0xff] %vm6360, %v14320
  %14385 = vst.msk [vmem:[%s5 + $0x108] sm:$0xff] %vm6360, %v14321
  %14386 = vst.msk [vmem:[%s5 + $0x110] sm:$0xff] %vm6360, %v14322
  %14387 = vst.msk [vmem:[%s5 + $0x118] sm:$0xff] %vm6360, %v14323
  %14388 = vst.msk [vmem:[%s5 + $0x120] sm:$0xff] %vm6360, %v14324
  %14389 = vst.msk [vmem:[%s5 + $0x128] sm:$0xff] %vm6360, %v14325
  %14390 = vst.msk [vmem:[%s5 + $0x130] sm:$0xff] %vm6360, %v14326
  %14391 = vst.msk [vmem:[%s5 + $0x138] sm:$0xff] %vm6360, %v14327
  %14392 = vst.msk [vmem:[%s5 + $0x140] sm:$0xff] %vm6360, %v14328
  %14393 = vst.msk [vmem:[%s5 + $0x148] sm:$0xff] %vm6360, %v14329
  %14394 = vst.msk [vmem:[%s5 + $0x150] sm:$0xff] %vm6360, %v14330
  %14395 = vst.msk [vmem:[%s5 + $0x158] sm:$0xff] %vm6360, %v14331
  %14396 = vst.msk [vmem:[%s5 + $0x160] sm:$0xff] %vm6360, %v14332
  %14397 = vst.msk [vmem:[%s5 + $0x168] sm:$0xff] %vm6360, %v14333
  %14398 = vst.msk [vmem:[%s5 + $0x170] sm:$0xff] %vm6360, %v14334
  %14399 = vst.msk [vmem:[%s5 + $0x178] sm:$0xff] %vm6360, %v14335
  %14400 = vst.msk [vmem:[%s5 + $0x180] sm:$0xff] %vm6360, %v14336
  %14401 = vst.msk [vmem:[%s5 + $0x188] sm:$0xff] %vm6360, %v14337
  %14402 = vst.msk [vmem:[%s5 + $0x190] sm:$0xff] %vm6360, %v14338
  %14403 = vst.msk [vmem:[%s5 + $0x198] sm:$0xff] %vm6360, %v14339
  %14404 = vst.msk [vmem:[%s5 + $0x1a0] sm:$0xff] %vm6360, %v14340
  %14405 = vst.msk [vmem:[%s5 + $0x1a8] sm:$0xff] %vm6360, %v14341
  %14406 = vst.msk [vmem:[%s5 + $0x1b0] sm:$0xff] %vm6360, %v14342
  %14407 = vst.msk [vmem:[%s5 + $0x1b8] sm:$0xff] %vm6360, %v14343
  %14408 = vst.msk [vmem:[%s5 + $0x1c0] sm:$0xff] %vm6360, %v14344
  %14409 = vst.msk [vmem:[%s5 + $0x1c8] sm:$0xff] %vm6360, %v14345
  %14410 = vst.msk [vmem:[%s5 + $0x1d0] sm:$0xff] %vm6360, %v14346
  %14411 = vst.msk [vmem:[%s5 + $0x1d8] sm:$0xff] %vm6360, %v14347
  %14412 = vst.msk [vmem:[%s5 + $0x1e0] sm:$0xff] %vm6360, %v14348
  %14413 = vst.msk [vmem:[%s5 + $0x1e8] sm:$0xff] %vm6360, %v14349
  %14414 = vst.msk [vmem:[%s5 + $0x1f0] sm:$0xff] %vm6360, %v14350
  %14415 = vst.msk [vmem:[%s5 + $0x1f8] sm:$0xff] %vm6360, %v14351
  // Predicated region
  $region22: #{residual_forward.1} parent=0 // pred_check
    _
  $region23: #{residual_forward.1} parent=0 // pred_check_branch
    %14417 = sbr.rel (0) target = $region25
  $region24: #{residual_forward.1} parent=0 // pred_region
    _
  $region25: #{residual_forward.1} parent=0 // pred_fallthru
    _
  // Predicated region
  $region26: #{residual_forward.1} parent=0 // pred_check
    _
  $region27: #{residual_forward.1} parent=0 // pred_check_branch
    %14419 = sbr.rel (0) target = $region29
  $region28: #{residual_forward.1} parent=0 // pred_region
    _
  $region29: #{residual_forward.1} parent=0 // pred_fallthru
    _

</llo_original>
